<compile_context>
chip_gen: v7x
topology: tpu7x:2x2x1
jax: 0.10.0
libtpu: 0.0.40
codegen_flags: <defaults>
</compile_context>

<pallas_src>
import functools

import numpy as np
import jax
import jax.numpy as jnp
from jax.experimental import pallas as pl
from jax.experimental.pallas import tpu as pltpu


def _vq_kernel(z_ref, e_ref, ed_ref, esqh_ref, zq_ref, idx_ref, cnt_ref, sq_ref,
               *, n_rows, dist_dtype):
    """One row-tile of vector quantization.

    Per grid step i:
      z_ref    : (tile_n, D)   rows of z, native dtype (zero-padded tail in last tile)
      e_ref    : (n_e, D)      f32 codebook (resident; used for the gather)
      ed_ref   : (n_e, D)      codebook pre-cast to dist_dtype (resident)
      esqh_ref : (n_e, 1)      precomputed 0.5 * sum(E^2, axis=1)
      zq_ref   : (tile_n, D)   quantized rows, output dtype
      idx_ref  : (1, tile_n)   argmin indices (lane-dense; sentinel n_e on pad rows)
      cnt_ref  : (1, 1, n_e)   per-tile codebook usage counts (lane-dense)
      sq_ref   : (1, 1, D)     per-tile, per-feature sum((z_q - z)^2)
    """
    i = pl.program_id(0)
    tile_n = z_ref.shape[0]
    n_e = e_ref.shape[0]

    z = z_ref[...]                                       # (tile_n, D) native dtype
    z32 = z if z.dtype == jnp.float32 else z.astype(jnp.float32)
    if np.dtype(dist_dtype) == np.dtype(jnp.float32):
        zd = z32
    elif z.dtype == np.dtype(dist_dtype):
        zd = z
    else:
        zd = z.astype(dist_dtype)

    # Transposed half-distances: d_t[k, t] = 0.5*|e_k|^2 - <e_k, z_t>
    # (monotonic in the true squared distance => same argmin).
    prod_t = jax.lax.dot_general(
        ed_ref[...], zd,
        dimension_numbers=(((1,), (1,)), ((), ())),
        preferred_element_type=jnp.float32)              # (n_e, tile_n)
    d_t = esqh_ref[...] - prod_t                         # (n_e, tile_n)

    # First-occurrence argmin over the codebook (sublane) axis, like torch.argmin.
    row_ids = jax.lax.broadcasted_iota(jnp.int32, (n_e, tile_n), 0)
    d_min = jnp.min(d_t, axis=0, keepdims=True)                          # (1, tile_n)
    idx = jnp.min(jnp.where(d_t == d_min, row_ids, n_e), axis=0,
                  keepdims=True)                                         # (1, tile_n)

    # Padded tail rows (only the last tile has any) -> sentinel n_e.  The
    # resulting all-zero one-hot column zeroes their z_q / diff / count
    # contributions for free (z itself is zero-padded).
    base = i * tile_n
    lane = jax.lax.broadcasted_iota(jnp.int32, (1, tile_n), 1)
    idx = jnp.where(lane + base < n_rows, idx, n_e)
    idx_ref[...] = idx

    # z_q = E[idx] as a one-hot matmul (MXU-friendly gather), exact in f32.
    one_hot_t = (row_ids == idx).astype(jnp.float32)                     # (n_e, tile_n)
    z_q = jax.lax.dot_general(
        one_hot_t, e_ref[...],
        dimension_numbers=(((0,), (0,)), ((), ())),
        preferred_element_type=jnp.float32)                              # (tile_n, D)
    zq_ref[...] = z_q.astype(zq_ref.dtype)

    # Per-tile partial reductions (finished in the wrapper); emitting partials
    # keeps the grid axis fully "parallel".  Counts come out lane-dense (1, n_e)
    # via a tiny M=1 matmul instead of one-lane masked stores.
    cnt_ref[0] = jax.lax.dot_general(
        jnp.ones((1, tile_n), jnp.float32), one_hot_t,
        dimension_numbers=(((1,), (1,)), ((), ())),
        preferred_element_type=jnp.float32)                              # (1, n_e)

    diff = z_q - z32
    sq_ref[0] = jnp.sum(diff * diff, axis=0, keepdims=True)              # (1, D)


def vector_quantize(z, embedding, beta, *, legacy=True, tile_n=2048,
                    dist_dtype=jnp.float32):
    """Forward pass of VectorQuantizer2 (remap=None, sane_index_shape=False).

    Returns (z_q, loss, min_encoding_indices, perplexity, codebooks_used).
    """
    out_dtype = z.dtype
    bz = z.shape[0]
    e_dim = z.shape[-1]
    n_e = embedding.shape[0]

    z_flat = z.reshape(-1, e_dim)                        # native dtype, no f32 copy
    n_rows = z_flat.shape[0]

    # Row tile: multiple of 128 keeps the index output lane-dense; remainder
    # rows are zero-padded and neutralized in-kernel via the sentinel index.
    tile_n = max(128, (int(tile_n) // 128) * 128)
    n_tiles = -(-n_rows // tile_n)
    n_pad = n_tiles * tile_n
    if n_pad != n_rows:
        z_flat = jnp.pad(z_flat, ((0, n_pad - n_rows), (0, 0)))

    emb_f32 = embedding.astype(jnp.float32)
    # Hoisted once (reused by every grid step): dist-dtype codebook copy and
    # 0.5*|E|^2 in column layout (broadcasts over the lane axis of d_t).
    emb_dist = emb_f32.astype(dist_dtype)
    e_sq_half = 0.5 * jnp.sum(emb_f32 * emb_f32, axis=1, keepdims=True)  # (n_e, 1)

    kernel = functools.partial(_vq_kernel, n_rows=n_rows, dist_dtype=dist_dtype)

    z_q_pad, idx_row, cnt_part, sq_part = pl.pallas_call(
        kernel,
        out_shape=(
            jax.ShapeDtypeStruct((n_pad, e_dim), out_dtype),
            jax.ShapeDtypeStruct((1, n_pad), jnp.int32),
            jax.ShapeDtypeStruct((n_tiles, 1, n_e), jnp.float32),
            jax.ShapeDtypeStruct((n_tiles, 1, e_dim), jnp.float32),
        ),
        grid_spec=pltpu.PrefetchScalarGridSpec(
            num_scalar_prefetch=0,
            grid=(n_tiles,),
            in_specs=[
                pl.BlockSpec((tile_n, e_dim), lambda i: (i, 0)),
                pl.BlockSpec((n_e, e_dim), lambda i: (0, 0)),   # resident f32 codebook
                pl.BlockSpec((n_e, e_dim), lambda i: (0, 0)),   # resident dist codebook
                pl.BlockSpec((n_e, 1), lambda i: (0, 0)),       # resident 0.5*|E|^2
            ],
            out_specs=[
                pl.BlockSpec((tile_n, e_dim), lambda i: (i, 0)),
                pl.BlockSpec((1, tile_n), lambda i: (0, i)),    # lane-dense indices
                pl.BlockSpec((1, 1, n_e), lambda i: (i, 0, 0)),  # lane-dense counts
                pl.BlockSpec((1, 1, e_dim), lambda i: (i, 0, 0)),
            ],
        ),
        compiler_params=pltpu.CompilerParams(
            # Independent row tiles + per-tile partials => fully parallel grid,
            # so v7x's two TensorCores can split the work.
            dimension_semantics=("parallel",),
            # ~15 MiB live at tile_n=2048 (pipelined tiles + (n_e, tile_n)
            # temporaries); 32 MiB leaves headroom on every generation incl.
            # v7x's 64 MiB/TC.  v5e/v6e could go tile_n=4096 / 48-64 MiB.
            vmem_limit_bytes=32 * 1024 * 1024,
        ),
    )(z_flat, emb_f32, emb_dist, e_sq_half)

    z_q_flat = z_q_pad[:n_rows]
    min_encoding_indices = idx_row[0, :n_rows]
    counts = jnp.sum(cnt_part, axis=0)[0]                                # (n_e,)
    sqerr = jnp.sum(sq_part)

    # TODO(synk): forward-only.  STE + commitment/codebook-loss gradients need a
    # jax.custom_vjp around the pallas_call before training use (the legacy /
    # non-legacy split only differs in which term is detached).
    mse = sqerr / jnp.float32(n_rows * e_dim)
    if legacy:
        loss = mse + beta * mse   # mean((sg(zq)-z)^2) + beta*mean((zq-sg(z))^2)
    else:
        loss = beta * mse + mse

    z_q_out = z_q_flat.reshape(bz, -1, e_dim)

    avg_probs = counts / jnp.float32(n_rows)
    perplexity = jnp.exp(-jnp.sum(avg_probs * jnp.log(avg_probs + 1e-12)))
    # Usage histogram (mirrors the codebooks_used buffer update).
    codebooks_used = counts.astype(jnp.int32)

    return z_q_out, loss, min_encoding_indices, perplexity, codebooks_used


def _check_case(key, *, B, T, n_e, e_dim, beta, tile_n, dist_dtype, z_dtype,
                idx_tol, gather_atol):
    kz, ke = jax.random.split(key)
    z = jax.random.normal(kz, (B, T, e_dim), dtype=jnp.float32).astype(z_dtype)
    # embedding.weight.data.uniform_(-1/n_e, 1/n_e)
    emb = jax.random.uniform(ke, (n_e, e_dim), dtype=jnp.float32,
                             minval=-1.0 / n_e, maxval=1.0 / n_e)

    fn = jax.jit(functools.partial(vector_quantize, beta=beta, tile_n=tile_n,
                                   dist_dtype=dist_dtype))
    z_q, loss, idx, perplexity, used = fn(z, emb)
    jax.block_until_ready((z_q, loss, idx, perplexity, used))

    n_rows = B * T
    zf = z.reshape(-1, e_dim).astype(jnp.float32)

    # Reference squared distances (pure JAX, f32).
    prod = jax.lax.dot_general(zf, emb, (((1,), (1,)), ((), ())),
                               preferred_element_type=jnp.float32)
    d_ref = (jnp.sum(zf * zf, axis=1, keepdims=True)
             + jnp.sum(emb * emb, axis=1)[None, :] - 2.0 * prod)

    assert z_q.shape == (B, T, e_dim)
    assert z_q.dtype == z.dtype
    assert idx.shape == (n_rows,)

    # 1) every chosen code is a (numerically) nearest codebook entry
    d_sel = d_ref[jnp.arange(n_rows), idx]
    assert bool(jnp.all(d_sel <= jnp.min(d_ref, axis=1) + idx_tol)), "argmin mismatch"

    # 2) forward value of z_q is the gathered codebook entry
    assert bool(jnp.allclose(z_q.astype(jnp.float32).reshape(-1, e_dim), emb[idx],
                             atol=gather_atol)), "gather mismatch"

    # 3) loss == (1 + beta) * mean((z_q - z)^2)
    mse_chk = jnp.mean((emb[idx] - zf) ** 2)
    assert bool(jnp.allclose(loss, (1.0 + beta) * mse_chk,
                             rtol=1e-4, atol=1e-6)), "loss mismatch"

    # 4) usage counts and perplexity (validates neutralization of padded rows)
    counts_chk = jnp.bincount(idx, length=n_e).astype(jnp.int32)
    assert bool(jnp.array_equal(used, counts_chk)), "counts mismatch"
    probs = counts_chk.astype(jnp.float32) / jnp.float32(n_rows)
    ppl_chk = jnp.exp(-jnp.sum(probs * jnp.log(probs + 1e-12)))
    assert bool(jnp.allclose(perplexity, ppl_chk, rtol=1e-4, atol=1e-4)), "perplexity mismatch"


if __name__ == "__main__":
    n_e, e_dim, beta = 256, 32, 0.25
    key = jax.random.PRNGKey(0)
    k1, k2, k3, k4 = jax.random.split(key, 4)

    # Module-sized case (B=2, T=8, e_dim=32), default tile_n=2048 / f32 distances:
    # exercises heavy padded-tail masking (16 -> 2048 rows).
    _check_case(k1, B=2, T=8, n_e=n_e, e_dim=e_dim, beta=beta,
                tile_n=2048, dist_dtype=jnp.float32, z_dtype=jnp.float32,
                idx_tol=1e-4, gather_atol=3e-5)

    # Multi-tile grid with a remainder (900 rows, tile 256 -> 4 tiles):
    # validates the per-tile count / sqerr partial-reduction path.
    _check_case(k2, B=3, T=300, n_e=n_e, e_dim=e_dim, beta=beta,
                tile_n=256, dist_dtype=jnp.float32, z_dtype=jnp.float32,
                idx_tol=1e-4, gather_atol=3e-5)

    # bf16 activations: native-dtype input DMA and bf16 z_q output path.
    _check_case(k3, B=2, T=8, n_e=n_e, e_dim=e_dim, beta=beta,
                tile_n=2048, dist_dtype=jnp.float32, z_dtype=jnp.bfloat16,
                idx_tol=1e-4, gather_atol=1e-4)

    # Optional bf16 distance matmul (argmin tolerance loosened for bf16 rounding).
    _check_case(k4, B=2, T=8, n_e=n_e, e_dim=e_dim, beta=beta,
                tile_n=2048, dist_dtype=jnp.bfloat16, z_dtype=jnp.float32,
                idx_tol=1e-2, gather_atol=3e-5)

    print("KERNEL_OK")
</pallas_src>

<mosaic_0001>
module attributes {stable_mosaic.version = 11 : i64} {
  func.func @_vq_kernel(%arg0: i32, %arg1: memref<2048x32xf32, #tpu.memory_space<vmem>>, %arg2: memref<256x32xf32, #tpu.memory_space<vmem>>, %arg3: memref<256x32xf32, #tpu.memory_space<vmem>>, %arg4: memref<256x1xf32, #tpu.memory_space<vmem>>, %arg5: memref<2048x32xf32, #tpu.memory_space<vmem>>, %arg6: memref<1x2048xi32, #tpu.memory_space<vmem>>, %arg7: memref<1x1x256xf32, #tpu.memory_space<vmem>>, %arg8: memref<1x1x32xf32, #tpu.memory_space<vmem>>) attributes {dimension_semantics = [#tpu.dimension_semantics<parallel>], iteration_bounds = array<i64: 1>, scalar_prefetch = 0 : i64, scratch_operands = 0 : i64, tpu.core_type = #tpu.core_type<tc>, window_params = [{transform_indices = @transform_0, window_bounds = array<i64: 2048, 32>}, {pipeline_mode = #tpu.pipeline_mode<synchronous>, transform_indices = @transform_1, window_bounds = array<i64: 256, 32>}, {pipeline_mode = #tpu.pipeline_mode<synchronous>, transform_indices = @transform_2, window_bounds = array<i64: 256, 32>}, {pipeline_mode = #tpu.pipeline_mode<synchronous>, transform_indices = @transform_3, window_bounds = array<i64: 256, 1>}, {transform_indices = @transform_4, window_bounds = array<i64: 2048, 32>}, {transform_indices = @transform_5, window_bounds = array<i64: 1, 2048>}, {transform_indices = @transform_6, window_bounds = array<i64: 1, 1, 256>}, {transform_indices = @transform_7, window_bounds = array<i64: 1, 1, 32>}]} {
    %c0 = arith.constant 0 : index
    %c0_0 = arith.constant 0 : index
    %0 = vector.load %arg1[%c0, %c0_0] : memref<2048x32xf32, #tpu.memory_space<vmem>>, vector<2048x32xf32>
    %c0_1 = arith.constant 0 : index
    %c0_2 = arith.constant 0 : index
    %1 = vector.load %arg3[%c0_1, %c0_2] : memref<256x32xf32, #tpu.memory_space<vmem>>, vector<256x32xf32>
    %cst = arith.constant dense<0.000000e+00> : vector<256x2048xf32>
    %2 = tpu.matmul %1, %0, %cst {dimension_numbers = #tpu.dot_dimension_numbers<[1], [1], [0], [0], [0, 0, 1, 0], [], []>} : vector<256x32xf32>, vector<2048x32xf32>, vector<256x2048xf32> -> vector<256x2048xf32>
    %c0_3 = arith.constant 0 : index
    %c0_4 = arith.constant 0 : index
    %3 = vector.load %arg4[%c0_3, %c0_4] : memref<256x1xf32, #tpu.memory_space<vmem>>, vector<256x1xf32>
    %4 = vector.broadcast %3 : vector<256x1xf32> to vector<256x2048xf32>
    %5 = arith.subf %4, %2 : vector<256x2048xf32>
    %6 = tpu.iota {dimensions = array<i32: 0>} : vector<256x2048xi32>
    %cst_5 = arith.constant dense<0x7F800000> : vector<2048xf32>
    %7 = vector.multi_reduction <minimumf>, %5, %cst_5 [0] : vector<256x2048xf32> to vector<2048xf32>
    %8 = vector.shape_cast %7 : vector<2048xf32> to vector<1x2048xf32>
    %9 = vector.broadcast %8 : vector<1x2048xf32> to vector<256x2048xf32>
    %10 = arith.cmpf oeq, %5, %9 : vector<256x2048xf32>
    %c256_i32 = arith.constant 256 : i32
    %11 = vector.broadcast %c256_i32 : i32 to vector<256x2048xi32>
    %12 = arith.select %10, %6, %11 : vector<256x2048xi1>, vector<256x2048xi32>
    %cst_6 = arith.constant dense<2147483647> : vector<2048xi32>
    %13 = vector.multi_reduction <minsi>, %12, %cst_6 [0] : vector<256x2048xi32> to vector<2048xi32>
    %14 = vector.shape_cast %13 : vector<2048xi32> to vector<1x2048xi32>
    %c2048_i32 = arith.constant 2048 : i32
    %15 = arith.muli %arg0, %c2048_i32 : i32
    %16 = tpu.iota {dimensions = array<i32: 1>} : vector<1x2048xi32>
    %17 = vector.broadcast %15 : i32 to vector<1x2048xi32>
    %18 = arith.addi %16, %17 : vector<1x2048xi32>
    %c16_i32 = arith.constant 16 : i32
    %19 = vector.broadcast %c16_i32 : i32 to vector<1x2048xi32>
    %20 = arith.cmpi slt, %18, %19 : vector<1x2048xi32>
    %c256_i32_7 = arith.constant 256 : i32
    %21 = vector.broadcast %c256_i32_7 : i32 to vector<1x2048xi32>
    %22 = arith.select %20, %14, %21 : vector<1x2048xi1>, vector<1x2048xi32>
    %c0_8 = arith.constant 0 : index
    %c0_9 = arith.constant 0 : index
    %23 = vector.load %arg6[%c0_8, %c0_9] : memref<1x2048xi32, #tpu.memory_space<vmem>>, vector<1x2048xi32>
    tpu.vector_store %arg6[%c0_8, %c0_9], %22 {strides = array<i32>} : memref<1x2048xi32, #tpu.memory_space<vmem>>, vector<1x2048xi32>,
    %24 = vector.broadcast %22 : vector<1x2048xi32> to vector<256x2048xi32>
    %25 = arith.cmpi eq, %6, %24 : vector<256x2048xi32>
    %26 = arith.extui %25 : vector<256x2048xi1> to vector<256x2048xi32>
    %27 = arith.sitofp %26 : vector<256x2048xi32> to vector<256x2048xf32>
    %c0_10 = arith.constant 0 : index
    %c0_11 = arith.constant 0 : index
    %28 = vector.load %arg2[%c0_10, %c0_11] : memref<256x32xf32, #tpu.memory_space<vmem>>, vector<256x32xf32>
    %cst_12 = arith.constant dense<0.000000e+00> : vector<2048x32xf32>
    %29 = tpu.matmul %27, %28, %cst_12 {dimension_numbers = #tpu.dot_dimension_numbers<[0], [0], [1], [1], [0, 1, 1, 1], [], []>} : vector<256x2048xf32>, vector<256x32xf32>, vector<2048x32xf32> -> vector<2048x32xf32>
    %c0_13 = arith.constant 0 : index
    %c0_14 = arith.constant 0 : index
    %30 = vector.load %arg5[%c0_13, %c0_14] : memref<2048x32xf32, #tpu.memory_space<vmem>>, vector<2048x32xf32>
    tpu.vector_store %arg5[%c0_13, %c0_14], %29 {strides = array<i32>} : memref<2048x32xf32, #tpu.memory_space<vmem>>, vector<2048x32xf32>,
    %cst_15 = arith.constant 1.000000e+00 : f32
    %31 = vector.broadcast %cst_15 : f32 to vector<1x2048xf32>
    %cst_16 = arith.constant dense<0.000000e+00> : vector<1x256xf32>
    %32 = tpu.matmul %31, %27, %cst_16 {dimension_numbers = #tpu.dot_dimension_numbers<[1], [1], [0], [0], [0, 0, 1, 0], [], []>} : vector<1x2048xf32>, vector<256x2048xf32>, vector<1x256xf32> -> vector<1x256xf32>
    %c0_17 = arith.constant 0 : index
    %c0_18 = arith.constant 0 : index
    %c0_19 = arith.constant 0 : index
    %33 = vector.load %arg7[%c0_17, %c0_18, %c0_19] : memref<1x1x256xf32, #tpu.memory_space<vmem>>, vector<1x1x256xf32>
    %34 = vector.shape_cast %33 : vector<1x1x256xf32> to vector<1x256xf32>
    %35 = vector.shape_cast %32 : vector<1x256xf32> to vector<1x1x256xf32>
    tpu.vector_store %arg7[%c0_17, %c0_18, %c0_19], %35 {strides = array<i32>} : memref<1x1x256xf32, #tpu.memory_space<vmem>>, vector<1x1x256xf32>,
    %36 = arith.subf %29, %0 : vector<2048x32xf32>
    %37 = arith.mulf %36, %36 : vector<2048x32xf32>
    %cst_20 = arith.constant dense<0.000000e+00> : vector<32xf32>
    %38 = vector.multi_reduction <add>, %37, %cst_20 [0] : vector<2048x32xf32> to vector<32xf32>
    %39 = vector.shape_cast %38 : vector<32xf32> to vector<1x32xf32>
    %c0_21 = arith.constant 0 : index
    %c0_22 = arith.constant 0 : index
    %c0_23 = arith.constant 0 : index
    %40 = vector.load %arg8[%c0_21, %c0_22, %c0_23] : memref<1x1x32xf32, #tpu.memory_space<vmem>>, vector<1x1x32xf32>
    %41 = vector.shape_cast %40 : vector<1x1x32xf32> to vector<1x32xf32>
    %42 = vector.shape_cast %39 : vector<1x32xf32> to vector<1x1x32xf32>
    tpu.vector_store %arg8[%c0_21, %c0_22, %c0_23], %42 {strides = array<i32>} : memref<1x1x32xf32, #tpu.memory_space<vmem>>, vector<1x1x32xf32>,
    return
  }
  func.func @transform_0(%arg0: i32) -> (i32, i32) {
    %c0_i32 = arith.constant 0 : i32
    %c0_i32_0 = arith.constant 0 : i32
    return %arg0, %c0_i32 : i32, i32
  }
  func.func @transform_1(%arg0: i32) -> (i32, i32) {
    %c0_i32 = arith.constant 0 : i32
    %c0_i32_0 = arith.constant 0 : i32
    %c0_i32_1 = arith.constant 0 : i32
    return %c0_i32, %c0_i32_0 : i32, i32
  }
  func.func @transform_2(%arg0: i32) -> (i32, i32) {
    %c0_i32 = arith.constant 0 : i32
    %c0_i32_0 = arith.constant 0 : i32
    %c0_i32_1 = arith.constant 0 : i32
    return %c0_i32, %c0_i32_0 : i32, i32
  }
  func.func @transform_3(%arg0: i32) -> (i32, i32) {
    %c0_i32 = arith.constant 0 : i32
    %c0_i32_0 = arith.constant 0 : i32
    %c0_i32_1 = arith.constant 0 : i32
    return %c0_i32, %c0_i32_0 : i32, i32
  }
  func.func @transform_4(%arg0: i32) -> (i32, i32) {
    %c0_i32 = arith.constant 0 : i32
    %c0_i32_0 = arith.constant 0 : i32
    return %arg0, %c0_i32 : i32, i32
  }
  func.func @transform_5(%arg0: i32) -> (i32, i32) {
    %c0_i32 = arith.constant 0 : i32
    %c0_i32_0 = arith.constant 0 : i32
    return %c0_i32, %arg0 : i32, i32
  }
  func.func @transform_6(%arg0: i32) -> (i32, i32, i32) {
    %c0_i32 = arith.constant 0 : i32
    %c0_i32_0 = arith.constant 0 : i32
    %c0_i32_1 = arith.constant 0 : i32
    return %arg0, %c0_i32, %c0_i32_0 : i32, i32, i32
  }
  func.func @transform_7(%arg0: i32) -> (i32, i32, i32) {
    %c0_i32 = arith.constant 0 : i32
    %c0_i32_0 = arith.constant 0 : i32
    %c0_i32_1 = arith.constant 0 : i32
    return %arg0, %c0_i32, %c0_i32_0 : i32, i32, i32
  }
}

</mosaic_0001>

<llo_original>
// kernel: vector_quantize.1
$region0: #{vector_quantize.1}
  #allocation0 [shape = 'u32[]', space=smem, size = 0x4, offset = 0x4, fixed_abs, tag = 'smem constant byte address 0x4 - core index']
  #allocation1 [shape = 'u32[144,128]{1,0:T(1,128)}', space=vmem, size = 0x12000, scoped, tag = 'internal scratch']
  %s0 = inlined_call_operand.vmem [shape: f32[2048,32], index: 0, kind: input, shape index: {}]
  %s1 = inlined_call_operand.vmem [shape: f32[256,32], index: 1, kind: input, shape index: {}, may-alias: {1,2}]
  %s2 = inlined_call_operand.vmem [shape: f32[256,32], index: 2, kind: input, shape index: {}, may-alias: {1,2}]
  %s3 = inlined_call_operand.vmem [shape: f32[256,1], index: 3, kind: input, shape index: {}]
  %s4 = inlined_call_operand.vmem [shape: f32[2048,32], index: 4, kind: output, shape index: {0}]
  %s5 = inlined_call_operand.vmem [shape: s32[1,2048], index: 5, kind: output, shape index: {1}]
  %s6 = inlined_call_operand.vmem [shape: f32[1,1,256], index: 6, kind: output, shape index: {2}]
  %s7 = inlined_call_operand.vmem [shape: f32[1,1,32], index: 7, kind: output, shape index: {3}]
  %8 = xla_tuple %s4, %s5, %s6, %s7
  %s9 = sld [smem:[#allocation0]]
  $region50: #{vector_quantize.1} parent=0
    _
  %s11 = ssub.s32 1, %s9
  %s12 = scalar_select 0, %s11, %s9
  // Predicated region
  $region2: #{vector_quantize.1} parent=0 // pred_check
    _
  $region3: #{vector_quantize.1} parent=0 // pred_check_branch
    %14 = sbr.rel (0) target = $region5
  $region4: #{vector_quantize.1} parent=0 // pred_region
    _
  $region5: #{vector_quantize.1} parent=0 // pred_fallthru
    _
  // Predicated region
  $region6: #{vector_quantize.1} parent=0 // pred_check
    _
  $region7: #{vector_quantize.1} parent=0 // pred_check_branch
    %16 = sbr.rel (0) target = $region9
  $region8: #{vector_quantize.1} parent=0 // pred_region
    _
  $region9: #{vector_quantize.1} parent=0 // pred_fallthru
    _
  // Predicated region
  $region10: #{vector_quantize.1} parent=0 // pred_check
    _
  $region11: #{vector_quantize.1} parent=0 // pred_check_branch
    %18 = sbr.rel (0) target = $region13
  $region12: #{vector_quantize.1} parent=0 // pred_region
    _
  $region13: #{vector_quantize.1} parent=0 // pred_fallthru
    _
  // Predicated region
  $region14: #{vector_quantize.1} parent=0 // pred_check
    _
  $region15: #{vector_quantize.1} parent=0 // pred_check_branch
    %20 = sbr.rel (0) target = $region17
  $region16: #{vector_quantize.1} parent=0 // pred_region
    _
  $region17: #{vector_quantize.1} parent=0 // pred_fallthru
    _
  %v21 = vld [vmem:[%s0] sm:$0xff]
  %v22 = vld [vmem:[%s0 + $0x8] sm:$0xff]
  %v23 = vld [vmem:[%s0 + $0x10] sm:$0xff]
  %v24 = vld [vmem:[%s0 + $0x18] sm:$0xff]
  %v25 = vld [vmem:[%s0 + $0x20] sm:$0xff]
  %v26 = vld [vmem:[%s0 + $0x28] sm:$0xff]
  %v27 = vld [vmem:[%s0 + $0x30] sm:$0xff]
  %v28 = vld [vmem:[%s0 + $0x38] sm:$0xff]
  %v29 = vld [vmem:[%s0 + $0x40] sm:$0xff]
  %v30 = vld [vmem:[%s0 + $0x48] sm:$0xff]
  %v31 = vld [vmem:[%s0 + $0x50] sm:$0xff]
  %v32 = vld [vmem:[%s0 + $0x58] sm:$0xff]
  %v33 = vld [vmem:[%s0 + $0x60] sm:$0xff]
  %v34 = vld [vmem:[%s0 + $0x68] sm:$0xff]
  %v35 = vld [vmem:[%s0 + $0x70] sm:$0xff]
  %v36 = vld [vmem:[%s0 + $0x78] sm:$0xff]
  %v37 = vld [vmem:[%s0 + $0x80] sm:$0xff]
  %v38 = vld [vmem:[%s0 + $0x88] sm:$0xff]
  %v39 = vld [vmem:[%s0 + $0x90] sm:$0xff]
  %v40 = vld [vmem:[%s0 + $0x98] sm:$0xff]
  %v41 = vld [vmem:[%s0 + $0xa0] sm:$0xff]
  %v42 = vld [vmem:[%s0 + $0xa8] sm:$0xff]
  %v43 = vld [vmem:[%s0 + $0xb0] sm:$0xff]
  %v44 = vld [vmem:[%s0 + $0xb8] sm:$0xff]
  %v45 = vld [vmem:[%s0 + $0xc0] sm:$0xff]
  %v46 = vld [vmem:[%s0 + $0xc8] sm:$0xff]
  %v47 = vld [vmem:[%s0 + $0xd0] sm:$0xff]
  %v48 = vld [vmem:[%s0 + $0xd8] sm:$0xff]
  %v49 = vld [vmem:[%s0 + $0xe0] sm:$0xff]
  %v50 = vld [vmem:[%s0 + $0xe8] sm:$0xff]
  %v51 = vld [vmem:[%s0 + $0xf0] sm:$0xff]
  %v52 = vld [vmem:[%s0 + $0xf8] sm:$0xff]
  %v53 = vld [vmem:[%s0 + $0x100] sm:$0xff]
  %v54 = vld [vmem:[%s0 + $0x108] sm:$0xff]
  %v55 = vld [vmem:[%s0 + $0x110] sm:$0xff]
  %v56 = vld [vmem:[%s0 + $0x118] sm:$0xff]
  %v57 = vld [vmem:[%s0 + $0x120] sm:$0xff]
  %v58 = vld [vmem:[%s0 + $0x128] sm:$0xff]
  %v59 = vld [vmem:[%s0 + $0x130] sm:$0xff]
  %v60 = vld [vmem:[%s0 + $0x138] sm:$0xff]
  %v61 = vld [vmem:[%s0 + $0x140] sm:$0xff]
  %v62 = vld [vmem:[%s0 + $0x148] sm:$0xff]
  %v63 = vld [vmem:[%s0 + $0x150] sm:$0xff]
  %v64 = vld [vmem:[%s0 + $0x158] sm:$0xff]
  %v65 = vld [vmem:[%s0 + $0x160] sm:$0xff]
  %v66 = vld [vmem:[%s0 + $0x168] sm:$0xff]
  %v67 = vld [vmem:[%s0 + $0x170] sm:$0xff]
  %v68 = vld [vmem:[%s0 + $0x178] sm:$0xff]
  %v69 = vld [vmem:[%s0 + $0x180] sm:$0xff]
  %v70 = vld [vmem:[%s0 + $0x188] sm:$0xff]
  %v71 = vld [vmem:[%s0 + $0x190] sm:$0xff]
  %v72 = vld [vmem:[%s0 + $0x198] sm:$0xff]
  %v73 = vld [vmem:[%s0 + $0x1a0] sm:$0xff]
  %v74 = vld [vmem:[%s0 + $0x1a8] sm:$0xff]
  %v75 = vld [vmem:[%s0 + $0x1b0] sm:$0xff]
  %v76 = vld [vmem:[%s0 + $0x1b8] sm:$0xff]
  %v77 = vld [vmem:[%s0 + $0x1c0] sm:$0xff]
  %v78 = vld [vmem:[%s0 + $0x1c8] sm:$0xff]
  %v79 = vld [vmem:[%s0 + $0x1d0] sm:$0xff]
  %v80 = vld [vmem:[%s0 + $0x1d8] sm:$0xff]
  %v81 = vld [vmem:[%s0 + $0x1e0] sm:$0xff]
  %v82 = vld [vmem:[%s0 + $0x1e8] sm:$0xff]
  %v83 = vld [vmem:[%s0 + $0x1f0] sm:$0xff]
  %v84 = vld [vmem:[%s0 + $0x1f8] sm:$0xff]
  %v85 = vld [vmem:[%s0 + $0x200] sm:$0xff]
  %v86 = vld [vmem:[%s0 + $0x208] sm:$0xff]
  %v87 = vld [vmem:[%s0 + $0x210] sm:$0xff]
  %v88 = vld [vmem:[%s0 + $0x218] sm:$0xff]
  %v89 = vld [vmem:[%s0 + $0x220] sm:$0xff]
  %v90 = vld [vmem:[%s0 + $0x228] sm:$0xff]
  %v91 = vld [vmem:[%s0 + $0x230] sm:$0xff]
  %v92 = vld [vmem:[%s0 + $0x238] sm:$0xff]
  %v93 = vld [vmem:[%s0 + $0x240] sm:$0xff]
  %v94 = vld [vmem:[%s0 + $0x248] sm:$0xff]
  %v95 = vld [vmem:[%s0 + $0x250] sm:$0xff]
  %v96 = vld [vmem:[%s0 + $0x258] sm:$0xff]
  %v97 = vld [vmem:[%s0 + $0x260] sm:$0xff]
  %v98 = vld [vmem:[%s0 + $0x268] sm:$0xff]
  %v99 = vld [vmem:[%s0 + $0x270] sm:$0xff]
  %v100 = vld [vmem:[%s0 + $0x278] sm:$0xff]
  %v101 = vld [vmem:[%s0 + $0x280] sm:$0xff]
  %v102 = vld [vmem:[%s0 + $0x288] sm:$0xff]
  %v103 = vld [vmem:[%s0 + $0x290] sm:$0xff]
  %v104 = vld [vmem:[%s0 + $0x298] sm:$0xff]
  %v105 = vld [vmem:[%s0 + $0x2a0] sm:$0xff]
  %v106 = vld [vmem:[%s0 + $0x2a8] sm:$0xff]
  %v107 = vld [vmem:[%s0 + $0x2b0] sm:$0xff]
  %v108 = vld [vmem:[%s0 + $0x2b8] sm:$0xff]
  %v109 = vld [vmem:[%s0 + $0x2c0] sm:$0xff]
  %v110 = vld [vmem:[%s0 + $0x2c8] sm:$0xff]
  %v111 = vld [vmem:[%s0 + $0x2d0] sm:$0xff]
  %v112 = vld [vmem:[%s0 + $0x2d8] sm:$0xff]
  %v113 = vld [vmem:[%s0 + $0x2e0] sm:$0xff]
  %v114 = vld [vmem:[%s0 + $0x2e8] sm:$0xff]
  %v115 = vld [vmem:[%s0 + $0x2f0] sm:$0xff]
  %v116 = vld [vmem:[%s0 + $0x2f8] sm:$0xff]
  %v117 = vld [vmem:[%s0 + $0x300] sm:$0xff]
  %v118 = vld [vmem:[%s0 + $0x308] sm:$0xff]
  %v119 = vld [vmem:[%s0 + $0x310] sm:$0xff]
  %v120 = vld [vmem:[%s0 + $0x318] sm:$0xff]
  %v121 = vld [vmem:[%s0 + $0x320] sm:$0xff]
  %v122 = vld [vmem:[%s0 + $0x328] sm:$0xff]
  %v123 = vld [vmem:[%s0 + $0x330] sm:$0xff]
  %v124 = vld [vmem:[%s0 + $0x338] sm:$0xff]
  %v125 = vld [vmem:[%s0 + $0x340] sm:$0xff]
  %v126 = vld [vmem:[%s0 + $0x348] sm:$0xff]
  %v127 = vld [vmem:[%s0 + $0x350] sm:$0xff]
  %v128 = vld [vmem:[%s0 + $0x358] sm:$0xff]
  %v129 = vld [vmem:[%s0 + $0x360] sm:$0xff]
  %v130 = vld [vmem:[%s0 + $0x368] sm:$0xff]
  %v131 = vld [vmem:[%s0 + $0x370] sm:$0xff]
  %v132 = vld [vmem:[%s0 + $0x378] sm:$0xff]
  %v133 = vld [vmem:[%s0 + $0x380] sm:$0xff]
  %v134 = vld [vmem:[%s0 + $0x388] sm:$0xff]
  %v135 = vld [vmem:[%s0 + $0x390] sm:$0xff]
  %v136 = vld [vmem:[%s0 + $0x398] sm:$0xff]
  %v137 = vld [vmem:[%s0 + $0x3a0] sm:$0xff]
  %v138 = vld [vmem:[%s0 + $0x3a8] sm:$0xff]
  %v139 = vld [vmem:[%s0 + $0x3b0] sm:$0xff]
  %v140 = vld [vmem:[%s0 + $0x3b8] sm:$0xff]
  %v141 = vld [vmem:[%s0 + $0x3c0] sm:$0xff]
  %v142 = vld [vmem:[%s0 + $0x3c8] sm:$0xff]
  %v143 = vld [vmem:[%s0 + $0x3d0] sm:$0xff]
  %v144 = vld [vmem:[%s0 + $0x3d8] sm:$0xff]
  %v145 = vld [vmem:[%s0 + $0x3e0] sm:$0xff]
  %v146 = vld [vmem:[%s0 + $0x3e8] sm:$0xff]
  %v147 = vld [vmem:[%s0 + $0x3f0] sm:$0xff]
  %v148 = vld [vmem:[%s0 + $0x3f8] sm:$0xff]
  %v149 = vld [vmem:[%s0 + $0x400] sm:$0xff]
  %v150 = vld [vmem:[%s0 + $0x408] sm:$0xff]
  %v151 = vld [vmem:[%s0 + $0x410] sm:$0xff]
  %v152 = vld [vmem:[%s0 + $0x418] sm:$0xff]
  %v153 = vld [vmem:[%s0 + $0x420] sm:$0xff]
  %v154 = vld [vmem:[%s0 + $0x428] sm:$0xff]
  %v155 = vld [vmem:[%s0 + $0x430] sm:$0xff]
  %v156 = vld [vmem:[%s0 + $0x438] sm:$0xff]
  %v157 = vld [vmem:[%s0 + $0x440] sm:$0xff]
  %v158 = vld [vmem:[%s0 + $0x448] sm:$0xff]
  %v159 = vld [vmem:[%s0 + $0x450] sm:$0xff]
  %v160 = vld [vmem:[%s0 + $0x458] sm:$0xff]
  %v161 = vld [vmem:[%s0 + $0x460] sm:$0xff]
  %v162 = vld [vmem:[%s0 + $0x468] sm:$0xff]
  %v163 = vld [vmem:[%s0 + $0x470] sm:$0xff]
  %v164 = vld [vmem:[%s0 + $0x478] sm:$0xff]
  %v165 = vld [vmem:[%s0 + $0x480] sm:$0xff]
  %v166 = vld [vmem:[%s0 + $0x488] sm:$0xff]
  %v167 = vld [vmem:[%s0 + $0x490] sm:$0xff]
  %v168 = vld [vmem:[%s0 + $0x498] sm:$0xff]
  %v169 = vld [vmem:[%s0 + $0x4a0] sm:$0xff]
  %v170 = vld [vmem:[%s0 + $0x4a8] sm:$0xff]
  %v171 = vld [vmem:[%s0 + $0x4b0] sm:$0xff]
  %v172 = vld [vmem:[%s0 + $0x4b8] sm:$0xff]
  %v173 = vld [vmem:[%s0 + $0x4c0] sm:$0xff]
  %v174 = vld [vmem:[%s0 + $0x4c8] sm:$0xff]
  %v175 = vld [vmem:[%s0 + $0x4d0] sm:$0xff]
  %v176 = vld [vmem:[%s0 + $0x4d8] sm:$0xff]
  %v177 = vld [vmem:[%s0 + $0x4e0] sm:$0xff]
  %v178 = vld [vmem:[%s0 + $0x4e8] sm:$0xff]
  %v179 = vld [vmem:[%s0 + $0x4f0] sm:$0xff]
  %v180 = vld [vmem:[%s0 + $0x4f8] sm:$0xff]
  %v181 = vld [vmem:[%s0 + $0x500] sm:$0xff]
  %v182 = vld [vmem:[%s0 + $0x508] sm:$0xff]
  %v183 = vld [vmem:[%s0 + $0x510] sm:$0xff]
  %v184 = vld [vmem:[%s0 + $0x518] sm:$0xff]
  %v185 = vld [vmem:[%s0 + $0x520] sm:$0xff]
  %v186 = vld [vmem:[%s0 + $0x528] sm:$0xff]
  %v187 = vld [vmem:[%s0 + $0x530] sm:$0xff]
  %v188 = vld [vmem:[%s0 + $0x538] sm:$0xff]
  %v189 = vld [vmem:[%s0 + $0x540] sm:$0xff]
  %v190 = vld [vmem:[%s0 + $0x548] sm:$0xff]
  %v191 = vld [vmem:[%s0 + $0x550] sm:$0xff]
  %v192 = vld [vmem:[%s0 + $0x558] sm:$0xff]
  %v193 = vld [vmem:[%s0 + $0x560] sm:$0xff]
  %v194 = vld [vmem:[%s0 + $0x568] sm:$0xff]
  %v195 = vld [vmem:[%s0 + $0x570] sm:$0xff]
  %v196 = vld [vmem:[%s0 + $0x578] sm:$0xff]
  %v197 = vld [vmem:[%s0 + $0x580] sm:$0xff]
  %v198 = vld [vmem:[%s0 + $0x588] sm:$0xff]
  %v199 = vld [vmem:[%s0 + $0x590] sm:$0xff]
  %v200 = vld [vmem:[%s0 + $0x598] sm:$0xff]
  %v201 = vld [vmem:[%s0 + $0x5a0] sm:$0xff]
  %v202 = vld [vmem:[%s0 + $0x5a8] sm:$0xff]
  %v203 = vld [vmem:[%s0 + $0x5b0] sm:$0xff]
  %v204 = vld [vmem:[%s0 + $0x5b8] sm:$0xff]
  %v205 = vld [vmem:[%s0 + $0x5c0] sm:$0xff]
  %v206 = vld [vmem:[%s0 + $0x5c8] sm:$0xff]
  %v207 = vld [vmem:[%s0 + $0x5d0] sm:$0xff]
  %v208 = vld [vmem:[%s0 + $0x5d8] sm:$0xff]
  %v209 = vld [vmem:[%s0 + $0x5e0] sm:$0xff]
  %v210 = vld [vmem:[%s0 + $0x5e8] sm:$0xff]
  %v211 = vld [vmem:[%s0 + $0x5f0] sm:$0xff]
  %v212 = vld [vmem:[%s0 + $0x5f8] sm:$0xff]
  %v213 = vld [vmem:[%s0 + $0x600] sm:$0xff]
  %v214 = vld [vmem:[%s0 + $0x608] sm:$0xff]
  %v215 = vld [vmem:[%s0 + $0x610] sm:$0xff]
  %v216 = vld [vmem:[%s0 + $0x618] sm:$0xff]
  %v217 = vld [vmem:[%s0 + $0x620] sm:$0xff]
  %v218 = vld [vmem:[%s0 + $0x628] sm:$0xff]
  %v219 = vld [vmem:[%s0 + $0x630] sm:$0xff]
  %v220 = vld [vmem:[%s0 + $0x638] sm:$0xff]
  %v221 = vld [vmem:[%s0 + $0x640] sm:$0xff]
  %v222 = vld [vmem:[%s0 + $0x648] sm:$0xff]
  %v223 = vld [vmem:[%s0 + $0x650] sm:$0xff]
  %v224 = vld [vmem:[%s0 + $0x658] sm:$0xff]
  %v225 = vld [vmem:[%s0 + $0x660] sm:$0xff]
  %v226 = vld [vmem:[%s0 + $0x668] sm:$0xff]
  %v227 = vld [vmem:[%s0 + $0x670] sm:$0xff]
  %v228 = vld [vmem:[%s0 + $0x678] sm:$0xff]
  %v229 = vld [vmem:[%s0 + $0x680] sm:$0xff]
  %v230 = vld [vmem:[%s0 + $0x688] sm:$0xff]
  %v231 = vld [vmem:[%s0 + $0x690] sm:$0xff]
  %v232 = vld [vmem:[%s0 + $0x698] sm:$0xff]
  %v233 = vld [vmem:[%s0 + $0x6a0] sm:$0xff]
  %v234 = vld [vmem:[%s0 + $0x6a8] sm:$0xff]
  %v235 = vld [vmem:[%s0 + $0x6b0] sm:$0xff]
  %v236 = vld [vmem:[%s0 + $0x6b8] sm:$0xff]
  %v237 = vld [vmem:[%s0 + $0x6c0] sm:$0xff]
  %v238 = vld [vmem:[%s0 + $0x6c8] sm:$0xff]
  %v239 = vld [vmem:[%s0 + $0x6d0] sm:$0xff]
  %v240 = vld [vmem:[%s0 + $0x6d8] sm:$0xff]
  %v241 = vld [vmem:[%s0 + $0x6e0] sm:$0xff]
  %v242 = vld [vmem:[%s0 + $0x6e8] sm:$0xff]
  %v243 = vld [vmem:[%s0 + $0x6f0] sm:$0xff]
  %v244 = vld [vmem:[%s0 + $0x6f8] sm:$0xff]
  %v245 = vld [vmem:[%s0 + $0x700] sm:$0xff]
  %v246 = vld [vmem:[%s0 + $0x708] sm:$0xff]
  %v247 = vld [vmem:[%s0 + $0x710] sm:$0xff]
  %v248 = vld [vmem:[%s0 + $0x718] sm:$0xff]
  %v249 = vld [vmem:[%s0 + $0x720] sm:$0xff]
  %v250 = vld [vmem:[%s0 + $0x728] sm:$0xff]
  %v251 = vld [vmem:[%s0 + $0x730] sm:$0xff]
  %v252 = vld [vmem:[%s0 + $0x738] sm:$0xff]
  %v253 = vld [vmem:[%s0 + $0x740] sm:$0xff]
  %v254 = vld [vmem:[%s0 + $0x748] sm:$0xff]
  %v255 = vld [vmem:[%s0 + $0x750] sm:$0xff]
  %v256 = vld [vmem:[%s0 + $0x758] sm:$0xff]
  %v257 = vld [vmem:[%s0 + $0x760] sm:$0xff]
  %v258 = vld [vmem:[%s0 + $0x768] sm:$0xff]
  %v259 = vld [vmem:[%s0 + $0x770] sm:$0xff]
  %v260 = vld [vmem:[%s0 + $0x778] sm:$0xff]
  %v261 = vld [vmem:[%s0 + $0x780] sm:$0xff]
  %v262 = vld [vmem:[%s0 + $0x788] sm:$0xff]
  %v263 = vld [vmem:[%s0 + $0x790] sm:$0xff]
  %v264 = vld [vmem:[%s0 + $0x798] sm:$0xff]
  %v265 = vld [vmem:[%s0 + $0x7a0] sm:$0xff]
  %v266 = vld [vmem:[%s0 + $0x7a8] sm:$0xff]
  %v267 = vld [vmem:[%s0 + $0x7b0] sm:$0xff]
  %v268 = vld [vmem:[%s0 + $0x7b8] sm:$0xff]
  %v269 = vld [vmem:[%s0 + $0x7c0] sm:$0xff]
  %v270 = vld [vmem:[%s0 + $0x7c8] sm:$0xff]
  %v271 = vld [vmem:[%s0 + $0x7d0] sm:$0xff]
  %v272 = vld [vmem:[%s0 + $0x7d8] sm:$0xff]
  %v273 = vld [vmem:[%s0 + $0x7e0] sm:$0xff]
  %v274 = vld [vmem:[%s0 + $0x7e8] sm:$0xff]
  %v275 = vld [vmem:[%s0 + $0x7f0] sm:$0xff]
  %v276 = vld [vmem:[%s0 + $0x7f8] sm:$0xff]
  %v277 = vld [vmem:[%s2] sm:$0xff]
  %v278 = vld [vmem:[%s2 + $0x8] sm:$0xff]
  %v279 = vld [vmem:[%s2 + $0x10] sm:$0xff]
  %v280 = vld [vmem:[%s2 + $0x18] sm:$0xff]
  %v281 = vld [vmem:[%s2 + $0x20] sm:$0xff]
  %v282 = vld [vmem:[%s2 + $0x28] sm:$0xff]
  %v283 = vld [vmem:[%s2 + $0x30] sm:$0xff]
  %v284 = vld [vmem:[%s2 + $0x38] sm:$0xff]
  %v285 = vld [vmem:[%s2 + $0x40] sm:$0xff]
  %v286 = vld [vmem:[%s2 + $0x48] sm:$0xff]
  %v287 = vld [vmem:[%s2 + $0x50] sm:$0xff]
  %v288 = vld [vmem:[%s2 + $0x58] sm:$0xff]
  %v289 = vld [vmem:[%s2 + $0x60] sm:$0xff]
  %v290 = vld [vmem:[%s2 + $0x68] sm:$0xff]
  %v291 = vld [vmem:[%s2 + $0x70] sm:$0xff]
  %v292 = vld [vmem:[%s2 + $0x78] sm:$0xff]
  %v293 = vld [vmem:[%s2 + $0x80] sm:$0xff]
  %v294 = vld [vmem:[%s2 + $0x88] sm:$0xff]
  %v295 = vld [vmem:[%s2 + $0x90] sm:$0xff]
  %v296 = vld [vmem:[%s2 + $0x98] sm:$0xff]
  %v297 = vld [vmem:[%s2 + $0xa0] sm:$0xff]
  %v298 = vld [vmem:[%s2 + $0xa8] sm:$0xff]
  %v299 = vld [vmem:[%s2 + $0xb0] sm:$0xff]
  %v300 = vld [vmem:[%s2 + $0xb8] sm:$0xff]
  %v301 = vld [vmem:[%s2 + $0xc0] sm:$0xff]
  %v302 = vld [vmem:[%s2 + $0xc8] sm:$0xff]
  %v303 = vld [vmem:[%s2 + $0xd0] sm:$0xff]
  %v304 = vld [vmem:[%s2 + $0xd8] sm:$0xff]
  %v305 = vld [vmem:[%s2 + $0xe0] sm:$0xff]
  %v306 = vld [vmem:[%s2 + $0xe8] sm:$0xff]
  %v307 = vld [vmem:[%s2 + $0xf0] sm:$0xff]
  %v308 = vld [vmem:[%s2 + $0xf8] sm:$0xff]
  %vm309 = vcmask 261120
  %v311 = vsel %vm309, %v277, 0
  %v314 = vsel %vm309, %v278, 0
  %v317 = vsel %vm309, %v279, 0
  %v320 = vsel %vm309, %v280, 0
  %v323 = vsel %vm309, %v281, 0
  %v326 = vsel %vm309, %v282, 0
  %v329 = vsel %vm309, %v283, 0
  %v332 = vsel %vm309, %v284, 0
  %v335 = vsel %vm309, %v285, 0
  %v338 = vsel %vm309, %v286, 0
  %v341 = vsel %vm309, %v287, 0
  %v344 = vsel %vm309, %v288, 0
  %v347 = vsel %vm309, %v289, 0
  %v350 = vsel %vm309, %v290, 0
  %v353 = vsel %vm309, %v291, 0
  %v356 = vsel %vm309, %v292, 0
  %v359 = vsel %vm309, %v293, 0
  %v362 = vsel %vm309, %v294, 0
  %v365 = vsel %vm309, %v295, 0
  %v368 = vsel %vm309, %v296, 0
  %v371 = vsel %vm309, %v297, 0
  %v374 = vsel %vm309, %v298, 0
  %v377 = vsel %vm309, %v299, 0
  %v380 = vsel %vm309, %v300, 0
  %v383 = vsel %vm309, %v301, 0
  %v386 = vsel %vm309, %v302, 0
  %v389 = vsel %vm309, %v303, 0
  %v392 = vsel %vm309, %v304, 0
  %v395 = vsel %vm309, %v305, 0
  %v398 = vsel %vm309, %v306, 0
  %v401 = vsel %vm309, %v307, 0
  %v404 = vsel %vm309, %v308, 0
  %v407 = vsel %vm309, %v21, 0
  %v410 = vsel %vm309, %v22, 0
  %v413 = vsel %vm309, %v23, 0
  %v416 = vsel %vm309, %v24, 0
  %v419 = vsel %vm309, %v25, 0
  %v422 = vsel %vm309, %v26, 0
  %v425 = vsel %vm309, %v27, 0
  %v428 = vsel %vm309, %v28, 0
  %v431 = vsel %vm309, %v29, 0
  %v434 = vsel %vm309, %v30, 0
  %v437 = vsel %vm309, %v31, 0
  %v440 = vsel %vm309, %v32, 0
  %v443 = vsel %vm309, %v33, 0
  %v446 = vsel %vm309, %v34, 0
  %v449 = vsel %vm309, %v35, 0
  %v452 = vsel %vm309, %v36, 0
  %v455 = vsel %vm309, %v37, 0
  %v458 = vsel %vm309, %v38, 0
  %v461 = vsel %vm309, %v39, 0
  %v464 = vsel %vm309, %v40, 0
  %v467 = vsel %vm309, %v41, 0
  %v470 = vsel %vm309, %v42, 0
  %v473 = vsel %vm309, %v43, 0
  %v476 = vsel %vm309, %v44, 0
  %v479 = vsel %vm309, %v45, 0
  %v482 = vsel %vm309, %v46, 0
  %v485 = vsel %vm309, %v47, 0
  %v488 = vsel %vm309, %v48, 0
  %v491 = vsel %vm309, %v49, 0
  %v494 = vsel %vm309, %v50, 0
  %v497 = vsel %vm309, %v51, 0
  %v500 = vsel %vm309, %v52, 0
  %v503 = vsel %vm309, %v53, 0
  %v506 = vsel %vm309, %v54, 0
  %v509 = vsel %vm309, %v55, 0
  %v512 = vsel %vm309, %v56, 0
  %v515 = vsel %vm309, %v57, 0
  %v518 = vsel %vm309, %v58, 0
  %v521 = vsel %vm309, %v59, 0
  %v524 = vsel %vm309, %v60, 0
  %v527 = vsel %vm309, %v61, 0
  %v530 = vsel %vm309, %v62, 0
  %v533 = vsel %vm309, %v63, 0
  %v536 = vsel %vm309, %v64, 0
  %v539 = vsel %vm309, %v65, 0
  %v542 = vsel %vm309, %v66, 0
  %v545 = vsel %vm309, %v67, 0
  %v548 = vsel %vm309, %v68, 0
  %v551 = vsel %vm309, %v69, 0
  %v554 = vsel %vm309, %v70, 0
  %v557 = vsel %vm309, %v71, 0
  %v560 = vsel %vm309, %v72, 0
  %v563 = vsel %vm309, %v73, 0
  %v566 = vsel %vm309, %v74, 0
  %v569 = vsel %vm309, %v75, 0
  %v572 = vsel %vm309, %v76, 0
  %v575 = vsel %vm309, %v77, 0
  %v578 = vsel %vm309, %v78, 0
  %v581 = vsel %vm309, %v79, 0
  %v584 = vsel %vm309, %v80, 0
  %v587 = vsel %vm309, %v81, 0
  %v590 = vsel %vm309, %v82, 0
  %v593 = vsel %vm309, %v83, 0
  %v596 = vsel %vm309, %v84, 0
  %v599 = vsel %vm309, %v85, 0
  %v602 = vsel %vm309, %v86, 0
  %v605 = vsel %vm309, %v87, 0
  %v608 = vsel %vm309, %v88, 0
  %v611 = vsel %vm309, %v89, 0
  %v614 = vsel %vm309, %v90, 0
  %v617 = vsel %vm309, %v91, 0
  %v620 = vsel %vm309, %v92, 0
  %v623 = vsel %vm309, %v93, 0
  %v626 = vsel %vm309, %v94, 0
  %v629 = vsel %vm309, %v95, 0
  %v632 = vsel %vm309, %v96, 0
  %v635 = vsel %vm309, %v97, 0
  %v638 = vsel %vm309, %v98, 0
  %v641 = vsel %vm309, %v99, 0
  %v644 = vsel %vm309, %v100, 0
  %v647 = vsel %vm309, %v101, 0
  %v650 = vsel %vm309, %v102, 0
  %v653 = vsel %vm309, %v103, 0
  %v656 = vsel %vm309, %v104, 0
  %v659 = vsel %vm309, %v105, 0
  %v662 = vsel %vm309, %v106, 0
  %v665 = vsel %vm309, %v107, 0
  %v668 = vsel %vm309, %v108, 0
  %v671 = vsel %vm309, %v109, 0
  %v674 = vsel %vm309, %v110, 0
  %v677 = vsel %vm309, %v111, 0
  %v680 = vsel %vm309, %v112, 0
  %v683 = vsel %vm309, %v113, 0
  %v686 = vsel %vm309, %v114, 0
  %v689 = vsel %vm309, %v115, 0
  %v692 = vsel %vm309, %v116, 0
  %v695 = vsel %vm309, %v117, 0
  %v698 = vsel %vm309, %v118, 0
  %v701 = vsel %vm309, %v119, 0
  %v704 = vsel %vm309, %v120, 0
  %v707 = vsel %vm309, %v121, 0
  %v710 = vsel %vm309, %v122, 0
  %v713 = vsel %vm309, %v123, 0
  %v716 = vsel %vm309, %v124, 0
  %v719 = vsel %vm309, %v125, 0
  %v722 = vsel %vm309, %v126, 0
  %v725 = vsel %vm309, %v127, 0
  %v728 = vsel %vm309, %v128, 0
  %v731 = vsel %vm309, %v129, 0
  %v734 = vsel %vm309, %v130, 0
  %v737 = vsel %vm309, %v131, 0
  %v740 = vsel %vm309, %v132, 0
  %v743 = vsel %vm309, %v133, 0
  %v746 = vsel %vm309, %v134, 0
  %v749 = vsel %vm309, %v135, 0
  %v752 = vsel %vm309, %v136, 0
  %v755 = vsel %vm309, %v137, 0
  %v758 = vsel %vm309, %v138, 0
  %v761 = vsel %vm309, %v139, 0
  %v764 = vsel %vm309, %v140, 0
  %v767 = vsel %vm309, %v141, 0
  %v770 = vsel %vm309, %v142, 0
  %v773 = vsel %vm309, %v143, 0
  %v776 = vsel %vm309, %v144, 0
  %v779 = vsel %vm309, %v145, 0
  %v782 = vsel %vm309, %v146, 0
  %v785 = vsel %vm309, %v147, 0
  %v788 = vsel %vm309, %v148, 0
  %v791 = vsel %vm309, %v149, 0
  %v794 = vsel %vm309, %v150, 0
  %v797 = vsel %vm309, %v151, 0
  %v800 = vsel %vm309, %v152, 0
  %v803 = vsel %vm309, %v153, 0
  %v806 = vsel %vm309, %v154, 0
  %v809 = vsel %vm309, %v155, 0
  %v812 = vsel %vm309, %v156, 0
  %v815 = vsel %vm309, %v157, 0
  %v818 = vsel %vm309, %v158, 0
  %v821 = vsel %vm309, %v159, 0
  %v824 = vsel %vm309, %v160, 0
  %v827 = vsel %vm309, %v161, 0
  %v830 = vsel %vm309, %v162, 0
  %v833 = vsel %vm309, %v163, 0
  %v836 = vsel %vm309, %v164, 0
  %v839 = vsel %vm309, %v165, 0
  %v842 = vsel %vm309, %v166, 0
  %v845 = vsel %vm309, %v167, 0
  %v848 = vsel %vm309, %v168, 0
  %v851 = vsel %vm309, %v169, 0
  %v854 = vsel %vm309, %v170, 0
  %v857 = vsel %vm309, %v171, 0
  %v860 = vsel %vm309, %v172, 0
  %v863 = vsel %vm309, %v173, 0
  %v866 = vsel %vm309, %v174, 0
  %v869 = vsel %vm309, %v175, 0
  %v872 = vsel %vm309, %v176, 0
  %v875 = vsel %vm309, %v177, 0
  %v878 = vsel %vm309, %v178, 0
  %v881 = vsel %vm309, %v179, 0
  %v884 = vsel %vm309, %v180, 0
  %v887 = vsel %vm309, %v181, 0
  %v890 = vsel %vm309, %v182, 0
  %v893 = vsel %vm309, %v183, 0
  %v896 = vsel %vm309, %v184, 0
  %v899 = vsel %vm309, %v185, 0
  %v902 = vsel %vm309, %v186, 0
  %v905 = vsel %vm309, %v187, 0
  %v908 = vsel %vm309, %v188, 0
  %v911 = vsel %vm309, %v189, 0
  %v914 = vsel %vm309, %v190, 0
  %v917 = vsel %vm309, %v191, 0
  %v920 = vsel %vm309, %v192, 0
  %v923 = vsel %vm309, %v193, 0
  %v926 = vsel %vm309, %v194, 0
  %v929 = vsel %vm309, %v195, 0
  %v932 = vsel %vm309, %v196, 0
  %v935 = vsel %vm309, %v197, 0
  %v938 = vsel %vm309, %v198, 0
  %v941 = vsel %vm309, %v199, 0
  %v944 = vsel %vm309, %v200, 0
  %v947 = vsel %vm309, %v201, 0
  %v950 = vsel %vm309, %v202, 0
  %v953 = vsel %vm309, %v203, 0
  %v956 = vsel %vm309, %v204, 0
  %v959 = vsel %vm309, %v205, 0
  %v962 = vsel %vm309, %v206, 0
  %v965 = vsel %vm309, %v207, 0
  %v968 = vsel %vm309, %v208, 0
  %v971 = vsel %vm309, %v209, 0
  %v974 = vsel %vm309, %v210, 0
  %v977 = vsel %vm309, %v211, 0
  %v980 = vsel %vm309, %v212, 0
  %v983 = vsel %vm309, %v213, 0
  %v986 = vsel %vm309, %v214, 0
  %v989 = vsel %vm309, %v215, 0
  %v992 = vsel %vm309, %v216, 0
  %v995 = vsel %vm309, %v217, 0
  %v998 = vsel %vm309, %v218, 0
  %v1001 = vsel %vm309, %v219, 0
  %v1004 = vsel %vm309, %v220, 0
  %v1007 = vsel %vm309, %v221, 0
  %v1010 = vsel %vm309, %v222, 0
  %v1013 = vsel %vm309, %v223, 0
  %v1016 = vsel %vm309, %v224, 0
  %v1019 = vsel %vm309, %v225, 0
  %v1022 = vsel %vm309, %v226, 0
  %v1025 = vsel %vm309, %v227, 0
  %v1028 = vsel %vm309, %v228, 0
  %v1031 = vsel %vm309, %v229, 0
  %v1034 = vsel %vm309, %v230, 0
  %v1037 = vsel %vm309, %v231, 0
  %v1040 = vsel %vm309, %v232, 0
  %v1043 = vsel %vm309, %v233, 0
  %v1046 = vsel %vm309, %v234, 0
  %v1049 = vsel %vm309, %v235, 0
  %v1052 = vsel %vm309, %v236, 0
  %v1055 = vsel %vm309, %v237, 0
  %v1058 = vsel %vm309, %v238, 0
  %v1061 = vsel %vm309, %v239, 0
  %v1064 = vsel %vm309, %v240, 0
  %v1067 = vsel %vm309, %v241, 0
  %v1070 = vsel %vm309, %v242, 0
  %v1073 = vsel %vm309, %v243, 0
  %v1076 = vsel %vm309, %v244, 0
  %v1079 = vsel %vm309, %v245, 0
  %v1082 = vsel %vm309, %v246, 0
  %v1085 = vsel %vm309, %v247, 0
  %v1088 = vsel %vm309, %v248, 0
  %v1091 = vsel %vm309, %v249, 0
  %v1094 = vsel %vm309, %v250, 0
  %v1097 = vsel %vm309, %v251, 0
  %v1100 = vsel %vm309, %v252, 0
  %v1103 = vsel %vm309, %v253, 0
  %v1106 = vsel %vm309, %v254, 0
  %v1109 = vsel %vm309, %v255, 0
  %v1112 = vsel %vm309, %v256, 0
  %v1115 = vsel %vm309, %v257, 0
  %v1118 = vsel %vm309, %v258, 0
  %v1121 = vsel %vm309, %v259, 0
  %v1124 = vsel %vm309, %v260, 0
  %v1127 = vsel %vm309, %v261, 0
  %v1130 = vsel %vm309, %v262, 0
  %v1133 = vsel %vm309, %v263, 0
  %v1136 = vsel %vm309, %v264, 0
  %v1139 = vsel %vm309, %v265, 0
  %v1142 = vsel %vm309, %v266, 0
  %v1145 = vsel %vm309, %v267, 0
  %v1148 = vsel %vm309, %v268, 0
  %v1151 = vsel %vm309, %v269, 0
  %v1154 = vsel %vm309, %v270, 0
  %v1157 = vsel %vm309, %v271, 0
  %v1160 = vsel %vm309, %v272, 0
  %v1163 = vsel %vm309, %v273, 0
  %v1166 = vsel %vm309, %v274, 0
  %v1169 = vsel %vm309, %v275, 0
  %v1172 = vsel %vm309, %v276, 0
  %1174 = vmatprep.subr.mxu0 0.0
  %1175 = vmatpush1.xpose.msra.mxu0 %v407
  %1176 = vmatprep.subr.mxu0 0.0
  %1177 = vmatpush1.xpose.msra.mxu0 %v410
  %1178 = vmatprep.subr.mxu0 0.0
  %1179 = vmatpush1.xpose.msra.mxu0 %v413
  %1180 = vmatprep.subr.mxu0 0.0
  %1181 = vmatpush1.xpose.msra.mxu0 %v416
  %1182 = vmatprep.subr.mxu0 0.0
  %1183 = vmatpush1.xpose.msra.mxu0 %v419
  %1184 = vmatprep.subr.mxu0 0.0
  %1185 = vmatpush1.xpose.msra.mxu0 %v422
  %1186 = vmatprep.subr.mxu0 0.0
  %1187 = vmatpush1.xpose.msra.mxu0 %v425
  %1188 = vmatprep.subr.mxu0 0.0
  %1189 = vmatpush1.xpose.msra.mxu0 %v428
  %1190 = vmatprep.subr.mxu0 0.0
  %1191 = vmatpush1.xpose.msra.mxu0 %v431
  %1192 = vmatprep.subr.mxu0 0.0
  %1193 = vmatpush1.xpose.msra.mxu0 %v434
  %1194 = vmatprep.subr.mxu0 0.0
  %1195 = vmatpush1.xpose.msra.mxu0 %v437
  %1196 = vmatprep.subr.mxu0 0.0
  %1197 = vmatpush1.xpose.msra.mxu0 %v440
  %1198 = vmatprep.subr.mxu0 0.0
  %1199 = vmatpush1.xpose.msra.mxu0 %v443
  %1200 = vmatprep.subr.mxu0 0.0
  %1201 = vmatpush1.xpose.msra.mxu0 %v446
  %1202 = vmatprep.subr.mxu0 0.0
  %1203 = vmatpush1.xpose.msra.mxu0 %v449
  %1204 = vmatprep.subr.mxu0 0.0
  %1205 = vmatpush1.xpose.msra.mxu0 %v452
  %1206 = vmatprep.subr.mxu0 0.0
  %1207 = vmatpush1.xpose.msra.mxu0 %v455
  %1208 = vmatprep.subr.mxu0 0.0
  %1209 = vmatpush1.xpose.msra.mxu0 %v458
  %1210 = vmatprep.subr.mxu0 0.0
  %1211 = vmatpush1.xpose.msra.mxu0 %v461
  %1212 = vmatprep.subr.mxu0 0.0
  %1213 = vmatpush1.xpose.msra.mxu0 %v464
  %1214 = vmatprep.subr.mxu0 0.0
  %1215 = vmatpush1.xpose.msra.mxu0 %v467
  %1216 = vmatprep.subr.mxu0 0.0
  %1217 = vmatpush1.xpose.msra.mxu0 %v470
  %1218 = vmatprep.subr.mxu0 0.0
  %1219 = vmatpush1.xpose.msra.mxu0 %v473
  %1220 = vmatprep.subr.mxu0 0.0
  %1221 = vmatpush1.xpose.msra.mxu0 %v476
  %1222 = vmatprep.subr.mxu0 0.0
  %1223 = vmatpush1.xpose.msra.mxu0 %v479
  %1224 = vmatprep.subr.mxu0 0.0
  %1225 = vmatpush1.xpose.msra.mxu0 %v482
  %1226 = vmatprep.subr.mxu0 0.0
  %1227 = vmatpush1.xpose.msra.mxu0 %v485
  %1228 = vmatprep.subr.mxu0 0.0
  %1229 = vmatpush1.xpose.msra.mxu0 %v488
  %1230 = vmatprep.subr.mxu0 0.0
  %1231 = vmatpush1.xpose.msra.mxu0 %v491
  %1232 = vmatprep.subr.mxu0 0.0
  %1233 = vmatpush1.xpose.msra.mxu0 %v494
  %1234 = vmatprep.subr.mxu0 0.0
  %1235 = vmatpush1.xpose.msra.mxu0 %v497
  %1236 = vmatprep.subr.mxu0 0.0
  %1237 = vmatpush1.xpose.msra.mxu0 %v500
  %1238 = vmatprep.mubr.f32.mxu0 0.0
  %1239 = vmatmul.mubr.f32.gmra.mrb[0].mxu0 %v311
  %v1240 = vpop.f32.mrb[0].mxu0
  %v1241 = vadd.f32 0.0, %v1240
  %v1242 = vpop.f32.mrb[0].mxu0
  %v1243 = vadd.f32 0.0, %v1242
  %1244 = vmatprep.mubr.f32.mxu0 0.0
  %1245 = vmatmul.mubr.f32.gmra.mrb[0].mxu0 %v314
  %v1246 = vpop.f32.mrb[0].mxu0
  %v1247 = vadd.f32 0.0, %v1246
  %v1248 = vpop.f32.mrb[0].mxu0
  %v1249 = vadd.f32 0.0, %v1248
  %1250 = vmatprep.mubr.f32.mxu0 0.0
  %1251 = vmatmul.mubr.f32.gmra.mrb[0].mxu0 %v317
  %v1252 = vpop.f32.mrb[0].mxu0
  %v1253 = vadd.f32 0.0, %v1252
  %v1254 = vpop.f32.mrb[0].mxu0
  %v1255 = vadd.f32 0.0, %v1254
  %1256 = vmatprep.mubr.f32.mxu0 0.0
  %1257 = vmatmul.mubr.f32.gmra.mrb[0].mxu0 %v320
  %v1258 = vpop.f32.mrb[0].mxu0
  %v1259 = vadd.f32 0.0, %v1258
  %v1260 = vpop.f32.mrb[0].mxu0
  %v1261 = vadd.f32 0.0, %v1260
  %1262 = vmatprep.mubr.f32.mxu0 0.0
  %1263 = vmatmul.mubr.f32.gmra.mrb[0].mxu0 %v323
  %v1264 = vpop.f32.mrb[0].mxu0
  %v1265 = vadd.f32 0.0, %v1264
  %v1266 = vpop.f32.mrb[0].mxu0
  %v1267 = vadd.f32 0.0, %v1266
  %1268 = vmatprep.mubr.f32.mxu0 0.0
  %1269 = vmatmul.mubr.f32.gmra.mrb[0].mxu0 %v326
  %v1270 = vpop.f32.mrb[0].mxu0
  %v1271 = vadd.f32 0.0, %v1270
  %v1272 = vpop.f32.mrb[0].mxu0
  %v1273 = vadd.f32 0.0, %v1272
  %1274 = vmatprep.mubr.f32.mxu0 0.0
  %1275 = vmatmul.mubr.f32.gmra.mrb[0].mxu0 %v329
  %v1276 = vpop.f32.mrb[0].mxu0
  %v1277 = vadd.f32 0.0, %v1276
  %v1278 = vpop.f32.mrb[0].mxu0
  %v1279 = vadd.f32 0.0, %v1278
  %1280 = vmatprep.mubr.f32.mxu0 0.0
  %1281 = vmatmul.mubr.f32.gmra.mrb[0].mxu0 %v332
  %v1282 = vpop.f32.mrb[0].mxu0
  %v1283 = vadd.f32 0.0, %v1282
  %v1284 = vpop.f32.mrb[0].mxu0
  %v1285 = vadd.f32 0.0, %v1284
  %1286 = vmatprep.mubr.f32.mxu0 0.0
  %1287 = vmatmul.mubr.f32.gmra.mrb[0].mxu0 %v335
  %v1288 = vpop.f32.mrb[0].mxu0
  %v1289 = vadd.f32 0.0, %v1288
  %v1290 = vpop.f32.mrb[0].mxu0
  %v1291 = vadd.f32 0.0, %v1290
  %1292 = vmatprep.mubr.f32.mxu0 0.0
  %1293 = vmatmul.mubr.f32.gmra.mrb[0].mxu0 %v338
  %v1294 = vpop.f32.mrb[0].mxu0
  %v1295 = vadd.f32 0.0, %v1294
  %v1296 = vpop.f32.mrb[0].mxu0
  %v1297 = vadd.f32 0.0, %v1296
  %1298 = vmatprep.mubr.f32.mxu0 0.0
  %1299 = vmatmul.mubr.f32.gmra.mrb[0].mxu0 %v341
  %v1300 = vpop.f32.mrb[0].mxu0
  %v1301 = vadd.f32 0.0, %v1300
  %v1302 = vpop.f32.mrb[0].mxu0
  %v1303 = vadd.f32 0.0, %v1302
  %1304 = vmatprep.mubr.f32.mxu0 0.0
  %1305 = vmatmul.mubr.f32.gmra.mrb[0].mxu0 %v344
  %v1306 = vpop.f32.mrb[0].mxu0
  %v1307 = vadd.f32 0.0, %v1306
  %v1308 = vpop.f32.mrb[0].mxu0
  %v1309 = vadd.f32 0.0, %v1308
  %1310 = vmatprep.mubr.f32.mxu0 0.0
  %1311 = vmatmul.mubr.f32.gmra.mrb[0].mxu0 %v347
  %v1312 = vpop.f32.mrb[0].mxu0
  %v1313 = vadd.f32 0.0, %v1312
  %v1314 = vpop.f32.mrb[0].mxu0
  %v1315 = vadd.f32 0.0, %v1314
  %1316 = vmatprep.mubr.f32.mxu0 0.0
  %1317 = vmatmul.mubr.f32.gmra.mrb[0].mxu0 %v350
  %v1318 = vpop.f32.mrb[0].mxu0
  %v1319 = vadd.f32 0.0, %v1318
  %v1320 = vpop.f32.mrb[0].mxu0
  %v1321 = vadd.f32 0.0, %v1320
  %1322 = vmatprep.mubr.f32.mxu0 0.0
  %1323 = vmatmul.mubr.f32.gmra.mrb[0].mxu0 %v353
  %v1324 = vpop.f32.mrb[0].mxu0
  %v1325 = vadd.f32 0.0, %v1324
  %v1326 = vpop.f32.mrb[0].mxu0
  %v1327 = vadd.f32 0.0, %v1326
  %1328 = vmatprep.mubr.f32.mxu0 0.0
  %1329 = vmatmul.mubr.f32.gmra.mrb[0].mxu0 %v356
  %v1330 = vpop.f32.mrb[0].mxu0
  %v1331 = vadd.f32 0.0, %v1330
  %v1332 = vpop.f32.mrb[0].mxu0
  %v1333 = vadd.f32 0.0, %v1332
  %1334 = vmatprep.mubr.f32.mxu0 0.0
  %1335 = vmatmul.mubr.f32.gmra.mrb[0].mxu0 %v359
  %v1336 = vpop.f32.mrb[0].mxu0
  %v1337 = vadd.f32 0.0, %v1336
  %v1338 = vpop.f32.mrb[0].mxu0
  %v1339 = vadd.f32 0.0, %v1338
  %1340 = vmatprep.mubr.f32.mxu0 0.0
  %1341 = vmatmul.mubr.f32.gmra.mrb[0].mxu0 %v362
  %v1342 = vpop.f32.mrb[0].mxu0
  %v1343 = vadd.f32 0.0, %v1342
  %v1344 = vpop.f32.mrb[0].mxu0
  %v1345 = vadd.f32 0.0, %v1344
  %1346 = vmatprep.mubr.f32.mxu0 0.0
  %1347 = vmatmul.mubr.f32.gmra.mrb[0].mxu0 %v365
  %v1348 = vpop.f32.mrb[0].mxu0
  %v1349 = vadd.f32 0.0, %v1348
  %v1350 = vpop.f32.mrb[0].mxu0
  %v1351 = vadd.f32 0.0, %v1350
  %1352 = vmatprep.mubr.f32.mxu0 0.0
  %1353 = vmatmul.mubr.f32.gmra.mrb[0].mxu0 %v368
  %v1354 = vpop.f32.mrb[0].mxu0
  %v1355 = vadd.f32 0.0, %v1354
  %v1356 = vpop.f32.mrb[0].mxu0
  %v1357 = vadd.f32 0.0, %v1356
  %1358 = vmatprep.mubr.f32.mxu0 0.0
  %1359 = vmatmul.mubr.f32.gmra.mrb[0].mxu0 %v371
  %v1360 = vpop.f32.mrb[0].mxu0
  %v1361 = vadd.f32 0.0, %v1360
  %v1362 = vpop.f32.mrb[0].mxu0
  %v1363 = vadd.f32 0.0, %v1362
  %1364 = vmatprep.mubr.f32.mxu0 0.0
  %1365 = vmatmul.mubr.f32.gmra.mrb[0].mxu0 %v374
  %v1366 = vpop.f32.mrb[0].mxu0
  %v1367 = vadd.f32 0.0, %v1366
  %v1368 = vpop.f32.mrb[0].mxu0
  %v1369 = vadd.f32 0.0, %v1368
  %1370 = vmatprep.mubr.f32.mxu0 0.0
  %1371 = vmatmul.mubr.f32.gmra.mrb[0].mxu0 %v377
  %v1372 = vpop.f32.mrb[0].mxu0
  %v1373 = vadd.f32 0.0, %v1372
  %v1374 = vpop.f32.mrb[0].mxu0
  %v1375 = vadd.f32 0.0, %v1374
  %1376 = vmatprep.mubr.f32.mxu0 0.0
  %1377 = vmatmul.mubr.f32.gmra.mrb[0].mxu0 %v380
  %v1378 = vpop.f32.mrb[0].mxu0
  %v1379 = vadd.f32 0.0, %v1378
  %v1380 = vpop.f32.mrb[0].mxu0
  %v1381 = vadd.f32 0.0, %v1380
  %1382 = vmatprep.mubr.f32.mxu0 0.0
  %1383 = vmatmul.mubr.f32.gmra.mrb[0].mxu0 %v383
  %v1384 = vpop.f32.mrb[0].mxu0
  %v1385 = vadd.f32 0.0, %v1384
  %v1386 = vpop.f32.mrb[0].mxu0
  %v1387 = vadd.f32 0.0, %v1386
  %1388 = vmatprep.mubr.f32.mxu0 0.0
  %1389 = vmatmul.mubr.f32.gmra.mrb[0].mxu0 %v386
  %v1390 = vpop.f32.mrb[0].mxu0
  %v1391 = vadd.f32 0.0, %v1390
  %v1392 = vpop.f32.mrb[0].mxu0
  %v1393 = vadd.f32 0.0, %v1392
  %1394 = vmatprep.mubr.f32.mxu0 0.0
  %1395 = vmatmul.mubr.f32.gmra.mrb[0].mxu0 %v389
  %v1396 = vpop.f32.mrb[0].mxu0
  %v1397 = vadd.f32 0.0, %v1396
  %v1398 = vpop.f32.mrb[0].mxu0
  %v1399 = vadd.f32 0.0, %v1398
  %1400 = vmatprep.mubr.f32.mxu0 0.0
  %1401 = vmatmul.mubr.f32.gmra.mrb[0].mxu0 %v392
  %v1402 = vpop.f32.mrb[0].mxu0
  %v1403 = vadd.f32 0.0, %v1402
  %v1404 = vpop.f32.mrb[0].mxu0
  %v1405 = vadd.f32 0.0, %v1404
  %1406 = vmatprep.mubr.f32.mxu0 0.0
  %1407 = vmatmul.mubr.f32.gmra.mrb[0].mxu0 %v395
  %v1408 = vpop.f32.mrb[0].mxu0
  %v1409 = vadd.f32 0.0, %v1408
  %v1410 = vpop.f32.mrb[0].mxu0
  %v1411 = vadd.f32 0.0, %v1410
  %1412 = vmatprep.mubr.f32.mxu0 0.0
  %1413 = vmatmul.mubr.f32.gmra.mrb[0].mxu0 %v398
  %v1414 = vpop.f32.mrb[0].mxu0
  %v1415 = vadd.f32 0.0, %v1414
  %v1416 = vpop.f32.mrb[0].mxu0
  %v1417 = vadd.f32 0.0, %v1416
  %1418 = vmatprep.mubr.f32.mxu0 0.0
  %1419 = vmatmul.mubr.f32.gmra.mrb[0].mxu0 %v401
  %v1420 = vpop.f32.mrb[0].mxu0
  %v1421 = vadd.f32 0.0, %v1420
  %v1422 = vpop.f32.mrb[0].mxu0
  %v1423 = vadd.f32 0.0, %v1422
  %1424 = vmatprep.mubr.f32.mxu0 0.0
  %1425 = vmatmul.mubr.f32.gmra.mrb[0].mxu0 %v404
  %v1426 = vpop.f32.mrb[0].mxu0
  %v1427 = vadd.f32 0.0, %v1426
  %v1428 = vpop.f32.mrb[0].mxu0
  %v1429 = vadd.f32 0.0, %v1428
  %1430 = vdwg.mxu0
  %1431 = vmatprep.subr.mxu0 0.0
  %1432 = vmatpush1.xpose.msra.mxu0 %v503
  %1433 = vmatprep.subr.mxu0 0.0
  %1434 = vmatpush1.xpose.msra.mxu0 %v506
  %1435 = vmatprep.subr.mxu0 0.0
  %1436 = vmatpush1.xpose.msra.mxu0 %v509
  %1437 = vmatprep.subr.mxu0 0.0
  %1438 = vmatpush1.xpose.msra.mxu0 %v512
  %1439 = vmatprep.subr.mxu0 0.0
  %1440 = vmatpush1.xpose.msra.mxu0 %v515
  %1441 = vmatprep.subr.mxu0 0.0
  %1442 = vmatpush1.xpose.msra.mxu0 %v518
  %1443 = vmatprep.subr.mxu0 0.0
  %1444 = vmatpush1.xpose.msra.mxu0 %v521
  %1445 = vmatprep.subr.mxu0 0.0
  %1446 = vmatpush1.xpose.msra.mxu0 %v524
  %1447 = vmatprep.subr.mxu0 0.0
  %1448 = vmatpush1.xpose.msra.mxu0 %v527
  %1449 = vmatprep.subr.mxu0 0.0
  %1450 = vmatpush1.xpose.msra.mxu0 %v530
  %1451 = vmatprep.subr.mxu0 0.0
  %1452 = vmatpush1.xpose.msra.mxu0 %v533
  %1453 = vmatprep.subr.mxu0 0.0
  %1454 = vmatpush1.xpose.msra.mxu0 %v536
  %1455 = vmatprep.subr.mxu0 0.0
  %1456 = vmatpush1.xpose.msra.mxu0 %v539
  %1457 = vmatprep.subr.mxu0 0.0
  %1458 = vmatpush1.xpose.msra.mxu0 %v542
  %1459 = vmatprep.subr.mxu0 0.0
  %1460 = vmatpush1.xpose.msra.mxu0 %v545
  %1461 = vmatprep.subr.mxu0 0.0
  %1462 = vmatpush1.xpose.msra.mxu0 %v548
  %1463 = vmatprep.subr.mxu0 0.0
  %1464 = vmatpush1.xpose.msra.mxu0 %v551
  %1465 = vmatprep.subr.mxu0 0.0
  %1466 = vmatpush1.xpose.msra.mxu0 %v554
  %1467 = vmatprep.subr.mxu0 0.0
  %1468 = vmatpush1.xpose.msra.mxu0 %v557
  %1469 = vmatprep.subr.mxu0 0.0
  %1470 = vmatpush1.xpose.msra.mxu0 %v560
  %1471 = vmatprep.subr.mxu0 0.0
  %1472 = vmatpush1.xpose.msra.mxu0 %v563
  %1473 = vmatprep.subr.mxu0 0.0
  %1474 = vmatpush1.xpose.msra.mxu0 %v566
  %1475 = vmatprep.subr.mxu0 0.0
  %1476 = vmatpush1.xpose.msra.mxu0 %v569
  %1477 = vmatprep.subr.mxu0 0.0
  %1478 = vmatpush1.xpose.msra.mxu0 %v572
  %1479 = vmatprep.subr.mxu0 0.0
  %1480 = vmatpush1.xpose.msra.mxu0 %v575
  %1481 = vmatprep.subr.mxu0 0.0
  %1482 = vmatpush1.xpose.msra.mxu0 %v578
  %1483 = vmatprep.subr.mxu0 0.0
  %1484 = vmatpush1.xpose.msra.mxu0 %v581
  %1485 = vmatprep.subr.mxu0 0.0
  %1486 = vmatpush1.xpose.msra.mxu0 %v584
  %1487 = vmatprep.subr.mxu0 0.0
  %1488 = vmatpush1.xpose.msra.mxu0 %v587
  %1489 = vmatprep.subr.mxu0 0.0
  %1490 = vmatpush1.xpose.msra.mxu0 %v590
  %1491 = vmatprep.subr.mxu0 0.0
  %1492 = vmatpush1.xpose.msra.mxu0 %v593
  %1493 = vmatprep.subr.mxu0 0.0
  %1494 = vmatpush1.xpose.msra.mxu0 %v596
  %1495 = vmatprep.mubr.f32.mxu0 0.0
  %1496 = vmatmul.mubr.f32.gmra.mrb[0].mxu0 %v311
  %v1497 = vpop.f32.mrb[0].mxu0
  %v1498 = vadd.f32 0.0, %v1497
  %v1499 = vpop.f32.mrb[0].mxu0
  %v1500 = vadd.f32 0.0, %v1499
  %1501 = vmatprep.mubr.f32.mxu0 0.0
  %1502 = vmatmul.mubr.f32.gmra.mrb[0].mxu0 %v314
  %v1503 = vpop.f32.mrb[0].mxu0
  %v1504 = vadd.f32 0.0, %v1503
  %v1505 = vpop.f32.mrb[0].mxu0
  %v1506 = vadd.f32 0.0, %v1505
  %1507 = vmatprep.mubr.f32.mxu0 0.0
  %1508 = vmatmul.mubr.f32.gmra.mrb[0].mxu0 %v317
  %v1509 = vpop.f32.mrb[0].mxu0
  %v1510 = vadd.f32 0.0, %v1509
  %v1511 = vpop.f32.mrb[0].mxu0
  %v1512 = vadd.f32 0.0, %v1511
  %1513 = vmatprep.mubr.f32.mxu0 0.0
  %1514 = vmatmul.mubr.f32.gmra.mrb[0].mxu0 %v320
  %v1515 = vpop.f32.mrb[0].mxu0
  %v1516 = vadd.f32 0.0, %v1515
  %v1517 = vpop.f32.mrb[0].mxu0
  %v1518 = vadd.f32 0.0, %v1517
  %1519 = vmatprep.mubr.f32.mxu0 0.0
  %1520 = vmatmul.mubr.f32.gmra.mrb[0].mxu0 %v323
  %v1521 = vpop.f32.mrb[0].mxu0
  %v1522 = vadd.f32 0.0, %v1521
  %v1523 = vpop.f32.mrb[0].mxu0
  %v1524 = vadd.f32 0.0, %v1523
  %1525 = vmatprep.mubr.f32.mxu0 0.0
  %1526 = vmatmul.mubr.f32.gmra.mrb[0].mxu0 %v326
  %v1527 = vpop.f32.mrb[0].mxu0
  %v1528 = vadd.f32 0.0, %v1527
  %v1529 = vpop.f32.mrb[0].mxu0
  %v1530 = vadd.f32 0.0, %v1529
  %1531 = vmatprep.mubr.f32.mxu0 0.0
  %1532 = vmatmul.mubr.f32.gmra.mrb[0].mxu0 %v329
  %v1533 = vpop.f32.mrb[0].mxu0
  %v1534 = vadd.f32 0.0, %v1533
  %v1535 = vpop.f32.mrb[0].mxu0
  %v1536 = vadd.f32 0.0, %v1535
  %1537 = vmatprep.mubr.f32.mxu0 0.0
  %1538 = vmatmul.mubr.f32.gmra.mrb[0].mxu0 %v332
  %v1539 = vpop.f32.mrb[0].mxu0
  %v1540 = vadd.f32 0.0, %v1539
  %v1541 = vpop.f32.mrb[0].mxu0
  %v1542 = vadd.f32 0.0, %v1541
  %1543 = vmatprep.mubr.f32.mxu0 0.0
  %1544 = vmatmul.mubr.f32.gmra.mrb[0].mxu0 %v335
  %v1545 = vpop.f32.mrb[0].mxu0
  %v1546 = vadd.f32 0.0, %v1545
  %v1547 = vpop.f32.mrb[0].mxu0
  %v1548 = vadd.f32 0.0, %v1547
  %1549 = vmatprep.mubr.f32.mxu0 0.0
  %1550 = vmatmul.mubr.f32.gmra.mrb[0].mxu0 %v338
  %v1551 = vpop.f32.mrb[0].mxu0
  %v1552 = vadd.f32 0.0, %v1551
  %v1553 = vpop.f32.mrb[0].mxu0
  %v1554 = vadd.f32 0.0, %v1553
  %1555 = vmatprep.mubr.f32.mxu0 0.0
  %1556 = vmatmul.mubr.f32.gmra.mrb[0].mxu0 %v341
  %v1557 = vpop.f32.mrb[0].mxu0
  %v1558 = vadd.f32 0.0, %v1557
  %v1559 = vpop.f32.mrb[0].mxu0
  %v1560 = vadd.f32 0.0, %v1559
  %1561 = vmatprep.mubr.f32.mxu0 0.0
  %1562 = vmatmul.mubr.f32.gmra.mrb[0].mxu0 %v344
  %v1563 = vpop.f32.mrb[0].mxu0
  %v1564 = vadd.f32 0.0, %v1563
  %v1565 = vpop.f32.mrb[0].mxu0
  %v1566 = vadd.f32 0.0, %v1565
  %1567 = vmatprep.mubr.f32.mxu0 0.0
  %1568 = vmatmul.mubr.f32.gmra.mrb[0].mxu0 %v347
  %v1569 = vpop.f32.mrb[0].mxu0
  %v1570 = vadd.f32 0.0, %v1569
  %v1571 = vpop.f32.mrb[0].mxu0
  %v1572 = vadd.f32 0.0, %v1571
  %1573 = vmatprep.mubr.f32.mxu0 0.0
  %1574 = vmatmul.mubr.f32.gmra.mrb[0].mxu0 %v350
  %v1575 = vpop.f32.mrb[0].mxu0
  %v1576 = vadd.f32 0.0, %v1575
  %v1577 = vpop.f32.mrb[0].mxu0
  %v1578 = vadd.f32 0.0, %v1577
  %1579 = vmatprep.mubr.f32.mxu0 0.0
  %1580 = vmatmul.mubr.f32.gmra.mrb[0].mxu0 %v353
  %v1581 = vpop.f32.mrb[0].mxu0
  %v1582 = vadd.f32 0.0, %v1581
  %v1583 = vpop.f32.mrb[0].mxu0
  %v1584 = vadd.f32 0.0, %v1583
  %1585 = vmatprep.mubr.f32.mxu0 0.0
  %1586 = vmatmul.mubr.f32.gmra.mrb[0].mxu0 %v356
  %v1587 = vpop.f32.mrb[0].mxu0
  %v1588 = vadd.f32 0.0, %v1587
  %v1589 = vpop.f32.mrb[0].mxu0
  %v1590 = vadd.f32 0.0, %v1589
  %1591 = vmatprep.mubr.f32.mxu0 0.0
  %1592 = vmatmul.mubr.f32.gmra.mrb[0].mxu0 %v359
  %v1593 = vpop.f32.mrb[0].mxu0
  %v1594 = vadd.f32 0.0, %v1593
  %v1595 = vpop.f32.mrb[0].mxu0
  %v1596 = vadd.f32 0.0, %v1595
  %1597 = vmatprep.mubr.f32.mxu0 0.0
  %1598 = vmatmul.mubr.f32.gmra.mrb[0].mxu0 %v362
  %v1599 = vpop.f32.mrb[0].mxu0
  %v1600 = vadd.f32 0.0, %v1599
  %v1601 = vpop.f32.mrb[0].mxu0
  %v1602 = vadd.f32 0.0, %v1601
  %1603 = vmatprep.mubr.f32.mxu0 0.0
  %1604 = vmatmul.mubr.f32.gmra.mrb[0].mxu0 %v365
  %v1605 = vpop.f32.mrb[0].mxu0
  %v1606 = vadd.f32 0.0, %v1605
  %v1607 = vpop.f32.mrb[0].mxu0
  %v1608 = vadd.f32 0.0, %v1607
  %1609 = vmatprep.mubr.f32.mxu0 0.0
  %1610 = vmatmul.mubr.f32.gmra.mrb[0].mxu0 %v368
  %v1611 = vpop.f32.mrb[0].mxu0
  %v1612 = vadd.f32 0.0, %v1611
  %v1613 = vpop.f32.mrb[0].mxu0
  %v1614 = vadd.f32 0.0, %v1613
  %1615 = vmatprep.mubr.f32.mxu0 0.0
  %1616 = vmatmul.mubr.f32.gmra.mrb[0].mxu0 %v371
  %v1617 = vpop.f32.mrb[0].mxu0
  %v1618 = vadd.f32 0.0, %v1617
  %v1619 = vpop.f32.mrb[0].mxu0
  %v1620 = vadd.f32 0.0, %v1619
  %1621 = vmatprep.mubr.f32.mxu0 0.0
  %1622 = vmatmul.mubr.f32.gmra.mrb[0].mxu0 %v374
  %v1623 = vpop.f32.mrb[0].mxu0
  %v1624 = vadd.f32 0.0, %v1623
  %v1625 = vpop.f32.mrb[0].mxu0
  %v1626 = vadd.f32 0.0, %v1625
  %1627 = vmatprep.mubr.f32.mxu0 0.0
  %1628 = vmatmul.mubr.f32.gmra.mrb[0].mxu0 %v377
  %v1629 = vpop.f32.mrb[0].mxu0
  %v1630 = vadd.f32 0.0, %v1629
  %v1631 = vpop.f32.mrb[0].mxu0
  %v1632 = vadd.f32 0.0, %v1631
  %1633 = vmatprep.mubr.f32.mxu0 0.0
  %1634 = vmatmul.mubr.f32.gmra.mrb[0].mxu0 %v380
  %v1635 = vpop.f32.mrb[0].mxu0
  %v1636 = vadd.f32 0.0, %v1635
  %v1637 = vpop.f32.mrb[0].mxu0
  %v1638 = vadd.f32 0.0, %v1637
  %1639 = vmatprep.mubr.f32.mxu0 0.0
  %1640 = vmatmul.mubr.f32.gmra.mrb[0].mxu0 %v383
  %v1641 = vpop.f32.mrb[0].mxu0
  %v1642 = vadd.f32 0.0, %v1641
  %v1643 = vpop.f32.mrb[0].mxu0
  %v1644 = vadd.f32 0.0, %v1643
  %1645 = vmatprep.mubr.f32.mxu0 0.0
  %1646 = vmatmul.mubr.f32.gmra.mrb[0].mxu0 %v386
  %v1647 = vpop.f32.mrb[0].mxu0
  %v1648 = vadd.f32 0.0, %v1647
  %v1649 = vpop.f32.mrb[0].mxu0
  %v1650 = vadd.f32 0.0, %v1649
  %1651 = vmatprep.mubr.f32.mxu0 0.0
  %1652 = vmatmul.mubr.f32.gmra.mrb[0].mxu0 %v389
  %v1653 = vpop.f32.mrb[0].mxu0
  %v1654 = vadd.f32 0.0, %v1653
  %v1655 = vpop.f32.mrb[0].mxu0
  %v1656 = vadd.f32 0.0, %v1655
  %1657 = vmatprep.mubr.f32.mxu0 0.0
  %1658 = vmatmul.mubr.f32.gmra.mrb[0].mxu0 %v392
  %v1659 = vpop.f32.mrb[0].mxu0
  %v1660 = vadd.f32 0.0, %v1659
  %v1661 = vpop.f32.mrb[0].mxu0
  %v1662 = vadd.f32 0.0, %v1661
  %1663 = vmatprep.mubr.f32.mxu0 0.0
  %1664 = vmatmul.mubr.f32.gmra.mrb[0].mxu0 %v395
  %v1665 = vpop.f32.mrb[0].mxu0
  %v1666 = vadd.f32 0.0, %v1665
  %v1667 = vpop.f32.mrb[0].mxu0
  %v1668 = vadd.f32 0.0, %v1667
  %1669 = vmatprep.mubr.f32.mxu0 0.0
  %1670 = vmatmul.mubr.f32.gmra.mrb[0].mxu0 %v398
  %v1671 = vpop.f32.mrb[0].mxu0
  %v1672 = vadd.f32 0.0, %v1671
  %v1673 = vpop.f32.mrb[0].mxu0
  %v1674 = vadd.f32 0.0, %v1673
  %1675 = vmatprep.mubr.f32.mxu0 0.0
  %1676 = vmatmul.mubr.f32.gmra.mrb[0].mxu0 %v401
  %v1677 = vpop.f32.mrb[0].mxu0
  %v1678 = vadd.f32 0.0, %v1677
  %v1679 = vpop.f32.mrb[0].mxu0
  %v1680 = vadd.f32 0.0, %v1679
  %1681 = vmatprep.mubr.f32.mxu0 0.0
  %1682 = vmatmul.mubr.f32.gmra.mrb[0].mxu0 %v404
  %v1683 = vpop.f32.mrb[0].mxu0
  %v1684 = vadd.f32 0.0, %v1683
  %v1685 = vpop.f32.mrb[0].mxu0
  %v1686 = vadd.f32 0.0, %v1685
  %1687 = vdwg.mxu0
  %1688 = vmatprep.subr.mxu0 0.0
  %1689 = vmatpush1.xpose.msra.mxu0 %v599
  %1690 = vmatprep.subr.mxu0 0.0
  %1691 = vmatpush1.xpose.msra.mxu0 %v602
  %1692 = vmatprep.subr.mxu0 0.0
  %1693 = vmatpush1.xpose.msra.mxu0 %v605
  %1694 = vmatprep.subr.mxu0 0.0
  %1695 = vmatpush1.xpose.msra.mxu0 %v608
  %1696 = vmatprep.subr.mxu0 0.0
  %1697 = vmatpush1.xpose.msra.mxu0 %v611
  %1698 = vmatprep.subr.mxu0 0.0
  %1699 = vmatpush1.xpose.msra.mxu0 %v614
  %1700 = vmatprep.subr.mxu0 0.0
  %1701 = vmatpush1.xpose.msra.mxu0 %v617
  %1702 = vmatprep.subr.mxu0 0.0
  %1703 = vmatpush1.xpose.msra.mxu0 %v620
  %1704 = vmatprep.subr.mxu0 0.0
  %1705 = vmatpush1.xpose.msra.mxu0 %v623
  %1706 = vmatprep.subr.mxu0 0.0
  %1707 = vmatpush1.xpose.msra.mxu0 %v626
  %1708 = vmatprep.subr.mxu0 0.0
  %1709 = vmatpush1.xpose.msra.mxu0 %v629
  %1710 = vmatprep.subr.mxu0 0.0
  %1711 = vmatpush1.xpose.msra.mxu0 %v632
  %1712 = vmatprep.subr.mxu0 0.0
  %1713 = vmatpush1.xpose.msra.mxu0 %v635
  %1714 = vmatprep.subr.mxu0 0.0
  %1715 = vmatpush1.xpose.msra.mxu0 %v638
  %1716 = vmatprep.subr.mxu0 0.0
  %1717 = vmatpush1.xpose.msra.mxu0 %v641
  %1718 = vmatprep.subr.mxu0 0.0
  %1719 = vmatpush1.xpose.msra.mxu0 %v644
  %1720 = vmatprep.subr.mxu0 0.0
  %1721 = vmatpush1.xpose.msra.mxu0 %v647
  %1722 = vmatprep.subr.mxu0 0.0
  %1723 = vmatpush1.xpose.msra.mxu0 %v650
  %1724 = vmatprep.subr.mxu0 0.0
  %1725 = vmatpush1.xpose.msra.mxu0 %v653
  %1726 = vmatprep.subr.mxu0 0.0
  %1727 = vmatpush1.xpose.msra.mxu0 %v656
  %1728 = vmatprep.subr.mxu0 0.0
  %1729 = vmatpush1.xpose.msra.mxu0 %v659
  %1730 = vmatprep.subr.mxu0 0.0
  %1731 = vmatpush1.xpose.msra.mxu0 %v662
  %1732 = vmatprep.subr.mxu0 0.0
  %1733 = vmatpush1.xpose.msra.mxu0 %v665
  %1734 = vmatprep.subr.mxu0 0.0
  %1735 = vmatpush1.xpose.msra.mxu0 %v668
  %1736 = vmatprep.subr.mxu0 0.0
  %1737 = vmatpush1.xpose.msra.mxu0 %v671
  %1738 = vmatprep.subr.mxu0 0.0
  %1739 = vmatpush1.xpose.msra.mxu0 %v674
  %1740 = vmatprep.subr.mxu0 0.0
  %1741 = vmatpush1.xpose.msra.mxu0 %v677
  %1742 = vmatprep.subr.mxu0 0.0
  %1743 = vmatpush1.xpose.msra.mxu0 %v680
  %1744 = vmatprep.subr.mxu0 0.0
  %1745 = vmatpush1.xpose.msra.mxu0 %v683
  %1746 = vmatprep.subr.mxu0 0.0
  %1747 = vmatpush1.xpose.msra.mxu0 %v686
  %1748 = vmatprep.subr.mxu0 0.0
  %1749 = vmatpush1.xpose.msra.mxu0 %v689
  %1750 = vmatprep.subr.mxu0 0.0
  %1751 = vmatpush1.xpose.msra.mxu0 %v692
  %1752 = vmatprep.mubr.f32.mxu0 0.0
  %1753 = vmatmul.mubr.f32.gmra.mrb[0].mxu0 %v311
  %v1754 = vpop.f32.mrb[0].mxu0
  %v1755 = vadd.f32 0.0, %v1754
  %v1756 = vpop.f32.mrb[0].mxu0
  %v1757 = vadd.f32 0.0, %v1756
  %1758 = vmatprep.mubr.f32.mxu0 0.0
  %1759 = vmatmul.mubr.f32.gmra.mrb[0].mxu0 %v314
  %v1760 = vpop.f32.mrb[0].mxu0
  %v1761 = vadd.f32 0.0, %v1760
  %v1762 = vpop.f32.mrb[0].mxu0
  %v1763 = vadd.f32 0.0, %v1762
  %1764 = vmatprep.mubr.f32.mxu0 0.0
  %1765 = vmatmul.mubr.f32.gmra.mrb[0].mxu0 %v317
  %v1766 = vpop.f32.mrb[0].mxu0
  %v1767 = vadd.f32 0.0, %v1766
  %v1768 = vpop.f32.mrb[0].mxu0
  %v1769 = vadd.f32 0.0, %v1768
  %1770 = vmatprep.mubr.f32.mxu0 0.0
  %1771 = vmatmul.mubr.f32.gmra.mrb[0].mxu0 %v320
  %v1772 = vpop.f32.mrb[0].mxu0
  %v1773 = vadd.f32 0.0, %v1772
  %v1774 = vpop.f32.mrb[0].mxu0
  %v1775 = vadd.f32 0.0, %v1774
  %1776 = vmatprep.mubr.f32.mxu0 0.0
  %1777 = vmatmul.mubr.f32.gmra.mrb[0].mxu0 %v323
  %v1778 = vpop.f32.mrb[0].mxu0
  %v1779 = vadd.f32 0.0, %v1778
  %v1780 = vpop.f32.mrb[0].mxu0
  %v1781 = vadd.f32 0.0, %v1780
  %1782 = vmatprep.mubr.f32.mxu0 0.0
  %1783 = vmatmul.mubr.f32.gmra.mrb[0].mxu0 %v326
  %v1784 = vpop.f32.mrb[0].mxu0
  %v1785 = vadd.f32 0.0, %v1784
  %v1786 = vpop.f32.mrb[0].mxu0
  %v1787 = vadd.f32 0.0, %v1786
  %1788 = vmatprep.mubr.f32.mxu0 0.0
  %1789 = vmatmul.mubr.f32.gmra.mrb[0].mxu0 %v329
  %v1790 = vpop.f32.mrb[0].mxu0
  %v1791 = vadd.f32 0.0, %v1790
  %v1792 = vpop.f32.mrb[0].mxu0
  %v1793 = vadd.f32 0.0, %v1792
  %1794 = vmatprep.mubr.f32.mxu0 0.0
  %1795 = vmatmul.mubr.f32.gmra.mrb[0].mxu0 %v332
  %v1796 = vpop.f32.mrb[0].mxu0
  %v1797 = vadd.f32 0.0, %v1796
  %v1798 = vpop.f32.mrb[0].mxu0
  %v1799 = vadd.f32 0.0, %v1798
  %1800 = vmatprep.mubr.f32.mxu0 0.0
  %1801 = vmatmul.mubr.f32.gmra.mrb[0].mxu0 %v335
  %v1802 = vpop.f32.mrb[0].mxu0
  %v1803 = vadd.f32 0.0, %v1802
  %v1804 = vpop.f32.mrb[0].mxu0
  %v1805 = vadd.f32 0.0, %v1804
  %1806 = vmatprep.mubr.f32.mxu0 0.0
  %1807 = vmatmul.mubr.f32.gmra.mrb[0].mxu0 %v338
  %v1808 = vpop.f32.mrb[0].mxu0
  %v1809 = vadd.f32 0.0, %v1808
  %v1810 = vpop.f32.mrb[0].mxu0
  %v1811 = vadd.f32 0.0, %v1810
  %1812 = vmatprep.mubr.f32.mxu0 0.0
  %1813 = vmatmul.mubr.f32.gmra.mrb[0].mxu0 %v341
  %v1814 = vpop.f32.mrb[0].mxu0
  %v1815 = vadd.f32 0.0, %v1814
  %v1816 = vpop.f32.mrb[0].mxu0
  %v1817 = vadd.f32 0.0, %v1816
  %1818 = vmatprep.mubr.f32.mxu0 0.0
  %1819 = vmatmul.mubr.f32.gmra.mrb[0].mxu0 %v344
  %v1820 = vpop.f32.mrb[0].mxu0
  %v1821 = vadd.f32 0.0, %v1820
  %v1822 = vpop.f32.mrb[0].mxu0
  %v1823 = vadd.f32 0.0, %v1822
  %1824 = vmatprep.mubr.f32.mxu0 0.0
  %1825 = vmatmul.mubr.f32.gmra.mrb[0].mxu0 %v347
  %v1826 = vpop.f32.mrb[0].mxu0
  %v1827 = vadd.f32 0.0, %v1826
  %v1828 = vpop.f32.mrb[0].mxu0
  %v1829 = vadd.f32 0.0, %v1828
  %1830 = vmatprep.mubr.f32.mxu0 0.0
  %1831 = vmatmul.mubr.f32.gmra.mrb[0].mxu0 %v350
  %v1832 = vpop.f32.mrb[0].mxu0
  %v1833 = vadd.f32 0.0, %v1832
  %v1834 = vpop.f32.mrb[0].mxu0
  %v1835 = vadd.f32 0.0, %v1834
  %1836 = vmatprep.mubr.f32.mxu0 0.0
  %1837 = vmatmul.mubr.f32.gmra.mrb[0].mxu0 %v353
  %v1838 = vpop.f32.mrb[0].mxu0
  %v1839 = vadd.f32 0.0, %v1838
  %v1840 = vpop.f32.mrb[0].mxu0
  %v1841 = vadd.f32 0.0, %v1840
  %1842 = vmatprep.mubr.f32.mxu0 0.0
  %1843 = vmatmul.mubr.f32.gmra.mrb[0].mxu0 %v356
  %v1844 = vpop.f32.mrb[0].mxu0
  %v1845 = vadd.f32 0.0, %v1844
  %v1846 = vpop.f32.mrb[0].mxu0
  %v1847 = vadd.f32 0.0, %v1846
  %1848 = vmatprep.mubr.f32.mxu0 0.0
  %1849 = vmatmul.mubr.f32.gmra.mrb[0].mxu0 %v359
  %v1850 = vpop.f32.mrb[0].mxu0
  %v1851 = vadd.f32 0.0, %v1850
  %v1852 = vpop.f32.mrb[0].mxu0
  %v1853 = vadd.f32 0.0, %v1852
  %1854 = vmatprep.mubr.f32.mxu0 0.0
  %1855 = vmatmul.mubr.f32.gmra.mrb[0].mxu0 %v362
  %v1856 = vpop.f32.mrb[0].mxu0
  %v1857 = vadd.f32 0.0, %v1856
  %v1858 = vpop.f32.mrb[0].mxu0
  %v1859 = vadd.f32 0.0, %v1858
  %1860 = vmatprep.mubr.f32.mxu0 0.0
  %1861 = vmatmul.mubr.f32.gmra.mrb[0].mxu0 %v365
  %v1862 = vpop.f32.mrb[0].mxu0
  %v1863 = vadd.f32 0.0, %v1862
  %v1864 = vpop.f32.mrb[0].mxu0
  %v1865 = vadd.f32 0.0, %v1864
  %1866 = vmatprep.mubr.f32.mxu0 0.0
  %1867 = vmatmul.mubr.f32.gmra.mrb[0].mxu0 %v368
  %v1868 = vpop.f32.mrb[0].mxu0
  %v1869 = vadd.f32 0.0, %v1868
  %v1870 = vpop.f32.mrb[0].mxu0
  %v1871 = vadd.f32 0.0, %v1870
  %1872 = vmatprep.mubr.f32.mxu0 0.0
  %1873 = vmatmul.mubr.f32.gmra.mrb[0].mxu0 %v371
  %v1874 = vpop.f32.mrb[0].mxu0
  %v1875 = vadd.f32 0.0, %v1874
  %v1876 = vpop.f32.mrb[0].mxu0
  %v1877 = vadd.f32 0.0, %v1876
  %1878 = vmatprep.mubr.f32.mxu0 0.0
  %1879 = vmatmul.mubr.f32.gmra.mrb[0].mxu0 %v374
  %v1880 = vpop.f32.mrb[0].mxu0
  %v1881 = vadd.f32 0.0, %v1880
  %v1882 = vpop.f32.mrb[0].mxu0
  %v1883 = vadd.f32 0.0, %v1882
  %1884 = vmatprep.mubr.f32.mxu0 0.0
  %1885 = vmatmul.mubr.f32.gmra.mrb[0].mxu0 %v377
  %v1886 = vpop.f32.mrb[0].mxu0
  %v1887 = vadd.f32 0.0, %v1886
  %v1888 = vpop.f32.mrb[0].mxu0
  %v1889 = vadd.f32 0.0, %v1888
  %1890 = vmatprep.mubr.f32.mxu0 0.0
  %1891 = vmatmul.mubr.f32.gmra.mrb[0].mxu0 %v380
  %v1892 = vpop.f32.mrb[0].mxu0
  %v1893 = vadd.f32 0.0, %v1892
  %v1894 = vpop.f32.mrb[0].mxu0
  %v1895 = vadd.f32 0.0, %v1894
  %1896 = vmatprep.mubr.f32.mxu0 0.0
  %1897 = vmatmul.mubr.f32.gmra.mrb[0].mxu0 %v383
  %v1898 = vpop.f32.mrb[0].mxu0
  %v1899 = vadd.f32 0.0, %v1898
  %v1900 = vpop.f32.mrb[0].mxu0
  %v1901 = vadd.f32 0.0, %v1900
  %1902 = vmatprep.mubr.f32.mxu0 0.0
  %1903 = vmatmul.mubr.f32.gmra.mrb[0].mxu0 %v386
  %v1904 = vpop.f32.mrb[0].mxu0
  %v1905 = vadd.f32 0.0, %v1904
  %v1906 = vpop.f32.mrb[0].mxu0
  %v1907 = vadd.f32 0.0, %v1906
  %1908 = vmatprep.mubr.f32.mxu0 0.0
  %1909 = vmatmul.mubr.f32.gmra.mrb[0].mxu0 %v389
  %v1910 = vpop.f32.mrb[0].mxu0
  %v1911 = vadd.f32 0.0, %v1910
  %v1912 = vpop.f32.mrb[0].mxu0
  %v1913 = vadd.f32 0.0, %v1912
  %1914 = vmatprep.mubr.f32.mxu0 0.0
  %1915 = vmatmul.mubr.f32.gmra.mrb[0].mxu0 %v392
  %v1916 = vpop.f32.mrb[0].mxu0
  %v1917 = vadd.f32 0.0, %v1916
  %v1918 = vpop.f32.mrb[0].mxu0
  %v1919 = vadd.f32 0.0, %v1918
  %1920 = vmatprep.mubr.f32.mxu0 0.0
  %1921 = vmatmul.mubr.f32.gmra.mrb[0].mxu0 %v395
  %v1922 = vpop.f32.mrb[0].mxu0
  %v1923 = vadd.f32 0.0, %v1922
  %v1924 = vpop.f32.mrb[0].mxu0
  %v1925 = vadd.f32 0.0, %v1924
  %1926 = vmatprep.mubr.f32.mxu0 0.0
  %1927 = vmatmul.mubr.f32.gmra.mrb[0].mxu0 %v398
  %v1928 = vpop.f32.mrb[0].mxu0
  %v1929 = vadd.f32 0.0, %v1928
  %v1930 = vpop.f32.mrb[0].mxu0
  %v1931 = vadd.f32 0.0, %v1930
  %1932 = vmatprep.mubr.f32.mxu0 0.0
  %1933 = vmatmul.mubr.f32.gmra.mrb[0].mxu0 %v401
  %v1934 = vpop.f32.mrb[0].mxu0
  %v1935 = vadd.f32 0.0, %v1934
  %v1936 = vpop.f32.mrb[0].mxu0
  %v1937 = vadd.f32 0.0, %v1936
  %1938 = vmatprep.mubr.f32.mxu0 0.0
  %1939 = vmatmul.mubr.f32.gmra.mrb[0].mxu0 %v404
  %v1940 = vpop.f32.mrb[0].mxu0
  %v1941 = vadd.f32 0.0, %v1940
  %v1942 = vpop.f32.mrb[0].mxu0
  %v1943 = vadd.f32 0.0, %v1942
  %1944 = vdwg.mxu0
  %1945 = vmatprep.subr.mxu0 0.0
  %1946 = vmatpush1.xpose.msra.mxu0 %v695
  %1947 = vmatprep.subr.mxu0 0.0
  %1948 = vmatpush1.xpose.msra.mxu0 %v698
  %1949 = vmatprep.subr.mxu0 0.0
  %1950 = vmatpush1.xpose.msra.mxu0 %v701
  %1951 = vmatprep.subr.mxu0 0.0
  %1952 = vmatpush1.xpose.msra.mxu0 %v704
  %1953 = vmatprep.subr.mxu0 0.0
  %1954 = vmatpush1.xpose.msra.mxu0 %v707
  %1955 = vmatprep.subr.mxu0 0.0
  %1956 = vmatpush1.xpose.msra.mxu0 %v710
  %1957 = vmatprep.subr.mxu0 0.0
  %1958 = vmatpush1.xpose.msra.mxu0 %v713
  %1959 = vmatprep.subr.mxu0 0.0
  %1960 = vmatpush1.xpose.msra.mxu0 %v716
  %1961 = vmatprep.subr.mxu0 0.0
  %1962 = vmatpush1.xpose.msra.mxu0 %v719
  %1963 = vmatprep.subr.mxu0 0.0
  %1964 = vmatpush1.xpose.msra.mxu0 %v722
  %1965 = vmatprep.subr.mxu0 0.0
  %1966 = vmatpush1.xpose.msra.mxu0 %v725
  %1967 = vmatprep.subr.mxu0 0.0
  %1968 = vmatpush1.xpose.msra.mxu0 %v728
  %1969 = vmatprep.subr.mxu0 0.0
  %1970 = vmatpush1.xpose.msra.mxu0 %v731
  %1971 = vmatprep.subr.mxu0 0.0
  %1972 = vmatpush1.xpose.msra.mxu0 %v734
  %1973 = vmatprep.subr.mxu0 0.0
  %1974 = vmatpush1.xpose.msra.mxu0 %v737
  %1975 = vmatprep.subr.mxu0 0.0
  %1976 = vmatpush1.xpose.msra.mxu0 %v740
  %1977 = vmatprep.subr.mxu0 0.0
  %1978 = vmatpush1.xpose.msra.mxu0 %v743
  %1979 = vmatprep.subr.mxu0 0.0
  %1980 = vmatpush1.xpose.msra.mxu0 %v746
  %1981 = vmatprep.subr.mxu0 0.0
  %1982 = vmatpush1.xpose.msra.mxu0 %v749
  %1983 = vmatprep.subr.mxu0 0.0
  %1984 = vmatpush1.xpose.msra.mxu0 %v752
  %1985 = vmatprep.subr.mxu0 0.0
  %1986 = vmatpush1.xpose.msra.mxu0 %v755
  %1987 = vmatprep.subr.mxu0 0.0
  %1988 = vmatpush1.xpose.msra.mxu0 %v758
  %1989 = vmatprep.subr.mxu0 0.0
  %1990 = vmatpush1.xpose.msra.mxu0 %v761
  %1991 = vmatprep.subr.mxu0 0.0
  %1992 = vmatpush1.xpose.msra.mxu0 %v764
  %1993 = vmatprep.subr.mxu0 0.0
  %1994 = vmatpush1.xpose.msra.mxu0 %v767
  %1995 = vmatprep.subr.mxu0 0.0
  %1996 = vmatpush1.xpose.msra.mxu0 %v770
  %1997 = vmatprep.subr.mxu0 0.0
  %1998 = vmatpush1.xpose.msra.mxu0 %v773
  %1999 = vmatprep.subr.mxu0 0.0
  %2000 = vmatpush1.xpose.msra.mxu0 %v776
  %2001 = vmatprep.subr.mxu0 0.0
  %2002 = vmatpush1.xpose.msra.mxu0 %v779
  %2003 = vmatprep.subr.mxu0 0.0
  %2004 = vmatpush1.xpose.msra.mxu0 %v782
  %2005 = vmatprep.subr.mxu0 0.0
  %2006 = vmatpush1.xpose.msra.mxu0 %v785
  %2007 = vmatprep.subr.mxu0 0.0
  %2008 = vmatpush1.xpose.msra.mxu0 %v788
  %2009 = vmatprep.mubr.f32.mxu0 0.0
  %2010 = vmatmul.mubr.f32.gmra.mrb[0].mxu0 %v311
  %v2011 = vpop.f32.mrb[0].mxu0
  %v2012 = vadd.f32 0.0, %v2011
  %v2013 = vpop.f32.mrb[0].mxu0
  %v2014 = vadd.f32 0.0, %v2013
  %2015 = vmatprep.mubr.f32.mxu0 0.0
  %2016 = vmatmul.mubr.f32.gmra.mrb[0].mxu0 %v314
  %v2017 = vpop.f32.mrb[0].mxu0
  %v2018 = vadd.f32 0.0, %v2017
  %v2019 = vpop.f32.mrb[0].mxu0
  %v2020 = vadd.f32 0.0, %v2019
  %2021 = vmatprep.mubr.f32.mxu0 0.0
  %2022 = vmatmul.mubr.f32.gmra.mrb[0].mxu0 %v317
  %v2023 = vpop.f32.mrb[0].mxu0
  %v2024 = vadd.f32 0.0, %v2023
  %v2025 = vpop.f32.mrb[0].mxu0
  %v2026 = vadd.f32 0.0, %v2025
  %2027 = vmatprep.mubr.f32.mxu0 0.0
  %2028 = vmatmul.mubr.f32.gmra.mrb[0].mxu0 %v320
  %v2029 = vpop.f32.mrb[0].mxu0
  %v2030 = vadd.f32 0.0, %v2029
  %v2031 = vpop.f32.mrb[0].mxu0
  %v2032 = vadd.f32 0.0, %v2031
  %2033 = vmatprep.mubr.f32.mxu0 0.0
  %2034 = vmatmul.mubr.f32.gmra.mrb[0].mxu0 %v323
  %v2035 = vpop.f32.mrb[0].mxu0
  %v2036 = vadd.f32 0.0, %v2035
  %v2037 = vpop.f32.mrb[0].mxu0
  %v2038 = vadd.f32 0.0, %v2037
  %2039 = vmatprep.mubr.f32.mxu0 0.0
  %2040 = vmatmul.mubr.f32.gmra.mrb[0].mxu0 %v326
  %v2041 = vpop.f32.mrb[0].mxu0
  %v2042 = vadd.f32 0.0, %v2041
  %v2043 = vpop.f32.mrb[0].mxu0
  %v2044 = vadd.f32 0.0, %v2043
  %2045 = vmatprep.mubr.f32.mxu0 0.0
  %2046 = vmatmul.mubr.f32.gmra.mrb[0].mxu0 %v329
  %v2047 = vpop.f32.mrb[0].mxu0
  %v2048 = vadd.f32 0.0, %v2047
  %v2049 = vpop.f32.mrb[0].mxu0
  %v2050 = vadd.f32 0.0, %v2049
  %2051 = vmatprep.mubr.f32.mxu0 0.0
  %2052 = vmatmul.mubr.f32.gmra.mrb[0].mxu0 %v332
  %v2053 = vpop.f32.mrb[0].mxu0
  %v2054 = vadd.f32 0.0, %v2053
  %v2055 = vpop.f32.mrb[0].mxu0
  %v2056 = vadd.f32 0.0, %v2055
  %2057 = vmatprep.mubr.f32.mxu0 0.0
  %2058 = vmatmul.mubr.f32.gmra.mrb[0].mxu0 %v335
  %v2059 = vpop.f32.mrb[0].mxu0
  %v2060 = vadd.f32 0.0, %v2059
  %v2061 = vpop.f32.mrb[0].mxu0
  %v2062 = vadd.f32 0.0, %v2061
  %2063 = vmatprep.mubr.f32.mxu0 0.0
  %2064 = vmatmul.mubr.f32.gmra.mrb[0].mxu0 %v338
  %v2065 = vpop.f32.mrb[0].mxu0
  %v2066 = vadd.f32 0.0, %v2065
  %v2067 = vpop.f32.mrb[0].mxu0
  %v2068 = vadd.f32 0.0, %v2067
  %2069 = vmatprep.mubr.f32.mxu0 0.0
  %2070 = vmatmul.mubr.f32.gmra.mrb[0].mxu0 %v341
  %v2071 = vpop.f32.mrb[0].mxu0
  %v2072 = vadd.f32 0.0, %v2071
  %v2073 = vpop.f32.mrb[0].mxu0
  %v2074 = vadd.f32 0.0, %v2073
  %2075 = vmatprep.mubr.f32.mxu0 0.0
  %2076 = vmatmul.mubr.f32.gmra.mrb[0].mxu0 %v344
  %v2077 = vpop.f32.mrb[0].mxu0
  %v2078 = vadd.f32 0.0, %v2077
  %v2079 = vpop.f32.mrb[0].mxu0
  %v2080 = vadd.f32 0.0, %v2079
  %2081 = vmatprep.mubr.f32.mxu0 0.0
  %2082 = vmatmul.mubr.f32.gmra.mrb[0].mxu0 %v347
  %v2083 = vpop.f32.mrb[0].mxu0
  %v2084 = vadd.f32 0.0, %v2083
  %v2085 = vpop.f32.mrb[0].mxu0
  %v2086 = vadd.f32 0.0, %v2085
  %2087 = vmatprep.mubr.f32.mxu0 0.0
  %2088 = vmatmul.mubr.f32.gmra.mrb[0].mxu0 %v350
  %v2089 = vpop.f32.mrb[0].mxu0
  %v2090 = vadd.f32 0.0, %v2089
  %v2091 = vpop.f32.mrb[0].mxu0
  %v2092 = vadd.f32 0.0, %v2091
  %2093 = vmatprep.mubr.f32.mxu0 0.0
  %2094 = vmatmul.mubr.f32.gmra.mrb[0].mxu0 %v353
  %v2095 = vpop.f32.mrb[0].mxu0
  %v2096 = vadd.f32 0.0, %v2095
  %v2097 = vpop.f32.mrb[0].mxu0
  %v2098 = vadd.f32 0.0, %v2097
  %2099 = vmatprep.mubr.f32.mxu0 0.0
  %2100 = vmatmul.mubr.f32.gmra.mrb[0].mxu0 %v356
  %v2101 = vpop.f32.mrb[0].mxu0
  %v2102 = vadd.f32 0.0, %v2101
  %v2103 = vpop.f32.mrb[0].mxu0
  %v2104 = vadd.f32 0.0, %v2103
  %2105 = vmatprep.mubr.f32.mxu0 0.0
  %2106 = vmatmul.mubr.f32.gmra.mrb[0].mxu0 %v359
  %v2107 = vpop.f32.mrb[0].mxu0
  %v2108 = vadd.f32 0.0, %v2107
  %v2109 = vpop.f32.mrb[0].mxu0
  %v2110 = vadd.f32 0.0, %v2109
  %2111 = vmatprep.mubr.f32.mxu0 0.0
  %2112 = vmatmul.mubr.f32.gmra.mrb[0].mxu0 %v362
  %v2113 = vpop.f32.mrb[0].mxu0
  %v2114 = vadd.f32 0.0, %v2113
  %v2115 = vpop.f32.mrb[0].mxu0
  %v2116 = vadd.f32 0.0, %v2115
  %2117 = vmatprep.mubr.f32.mxu0 0.0
  %2118 = vmatmul.mubr.f32.gmra.mrb[0].mxu0 %v365
  %v2119 = vpop.f32.mrb[0].mxu0
  %v2120 = vadd.f32 0.0, %v2119
  %v2121 = vpop.f32.mrb[0].mxu0
  %v2122 = vadd.f32 0.0, %v2121
  %2123 = vmatprep.mubr.f32.mxu0 0.0
  %2124 = vmatmul.mubr.f32.gmra.mrb[0].mxu0 %v368
  %v2125 = vpop.f32.mrb[0].mxu0
  %v2126 = vadd.f32 0.0, %v2125
  %v2127 = vpop.f32.mrb[0].mxu0
  %v2128 = vadd.f32 0.0, %v2127
  %2129 = vmatprep.mubr.f32.mxu0 0.0
  %2130 = vmatmul.mubr.f32.gmra.mrb[0].mxu0 %v371
  %v2131 = vpop.f32.mrb[0].mxu0
  %v2132 = vadd.f32 0.0, %v2131
  %v2133 = vpop.f32.mrb[0].mxu0
  %v2134 = vadd.f32 0.0, %v2133
  %2135 = vmatprep.mubr.f32.mxu0 0.0
  %2136 = vmatmul.mubr.f32.gmra.mrb[0].mxu0 %v374
  %v2137 = vpop.f32.mrb[0].mxu0
  %v2138 = vadd.f32 0.0, %v2137
  %v2139 = vpop.f32.mrb[0].mxu0
  %v2140 = vadd.f32 0.0, %v2139
  %2141 = vmatprep.mubr.f32.mxu0 0.0
  %2142 = vmatmul.mubr.f32.gmra.mrb[0].mxu0 %v377
  %v2143 = vpop.f32.mrb[0].mxu0
  %v2144 = vadd.f32 0.0, %v2143
  %v2145 = vpop.f32.mrb[0].mxu0
  %v2146 = vadd.f32 0.0, %v2145
  %2147 = vmatprep.mubr.f32.mxu0 0.0
  %2148 = vmatmul.mubr.f32.gmra.mrb[0].mxu0 %v380
  %v2149 = vpop.f32.mrb[0].mxu0
  %v2150 = vadd.f32 0.0, %v2149
  %v2151 = vpop.f32.mrb[0].mxu0
  %v2152 = vadd.f32 0.0, %v2151
  %2153 = vmatprep.mubr.f32.mxu0 0.0
  %2154 = vmatmul.mubr.f32.gmra.mrb[0].mxu0 %v383
  %v2155 = vpop.f32.mrb[0].mxu0
  %v2156 = vadd.f32 0.0, %v2155
  %v2157 = vpop.f32.mrb[0].mxu0
  %v2158 = vadd.f32 0.0, %v2157
  %2159 = vmatprep.mubr.f32.mxu0 0.0
  %2160 = vmatmul.mubr.f32.gmra.mrb[0].mxu0 %v386
  %v2161 = vpop.f32.mrb[0].mxu0
  %v2162 = vadd.f32 0.0, %v2161
  %v2163 = vpop.f32.mrb[0].mxu0
  %v2164 = vadd.f32 0.0, %v2163
  %2165 = vmatprep.mubr.f32.mxu0 0.0
  %2166 = vmatmul.mubr.f32.gmra.mrb[0].mxu0 %v389
  %v2167 = vpop.f32.mrb[0].mxu0
  %v2168 = vadd.f32 0.0, %v2167
  %v2169 = vpop.f32.mrb[0].mxu0
  %v2170 = vadd.f32 0.0, %v2169
  %2171 = vmatprep.mubr.f32.mxu0 0.0
  %2172 = vmatmul.mubr.f32.gmra.mrb[0].mxu0 %v392
  %v2173 = vpop.f32.mrb[0].mxu0
  %v2174 = vadd.f32 0.0, %v2173
  %v2175 = vpop.f32.mrb[0].mxu0
  %v2176 = vadd.f32 0.0, %v2175
  %2177 = vmatprep.mubr.f32.mxu0 0.0
  %2178 = vmatmul.mubr.f32.gmra.mrb[0].mxu0 %v395
  %v2179 = vpop.f32.mrb[0].mxu0
  %v2180 = vadd.f32 0.0, %v2179
  %v2181 = vpop.f32.mrb[0].mxu0
  %v2182 = vadd.f32 0.0, %v2181
  %2183 = vmatprep.mubr.f32.mxu0 0.0
  %2184 = vmatmul.mubr.f32.gmra.mrb[0].mxu0 %v398
  %v2185 = vpop.f32.mrb[0].mxu0
  %v2186 = vadd.f32 0.0, %v2185
  %v2187 = vpop.f32.mrb[0].mxu0
  %v2188 = vadd.f32 0.0, %v2187
  %2189 = vmatprep.mubr.f32.mxu0 0.0
  %2190 = vmatmul.mubr.f32.gmra.mrb[0].mxu0 %v401
  %v2191 = vpop.f32.mrb[0].mxu0
  %v2192 = vadd.f32 0.0, %v2191
  %v2193 = vpop.f32.mrb[0].mxu0
  %v2194 = vadd.f32 0.0, %v2193
  %2195 = vmatprep.mubr.f32.mxu0 0.0
  %2196 = vmatmul.mubr.f32.gmra.mrb[0].mxu0 %v404
  %v2197 = vpop.f32.mrb[0].mxu0
  %v2198 = vadd.f32 0.0, %v2197
  %v2199 = vpop.f32.mrb[0].mxu0
  %v2200 = vadd.f32 0.0, %v2199
  %2201 = vdwg.mxu0
  %2202 = vmatprep.subr.mxu0 0.0
  %2203 = vmatpush1.xpose.msra.mxu0 %v791
  %2204 = vmatprep.subr.mxu0 0.0
  %2205 = vmatpush1.xpose.msra.mxu0 %v794
  %2206 = vmatprep.subr.mxu0 0.0
  %2207 = vmatpush1.xpose.msra.mxu0 %v797
  %2208 = vmatprep.subr.mxu0 0.0
  %2209 = vmatpush1.xpose.msra.mxu0 %v800
  %2210 = vmatprep.subr.mxu0 0.0
  %2211 = vmatpush1.xpose.msra.mxu0 %v803
  %2212 = vmatprep.subr.mxu0 0.0
  %2213 = vmatpush1.xpose.msra.mxu0 %v806
  %2214 = vmatprep.subr.mxu0 0.0
  %2215 = vmatpush1.xpose.msra.mxu0 %v809
  %2216 = vmatprep.subr.mxu0 0.0
  %2217 = vmatpush1.xpose.msra.mxu0 %v812
  %2218 = vmatprep.subr.mxu0 0.0
  %2219 = vmatpush1.xpose.msra.mxu0 %v815
  %2220 = vmatprep.subr.mxu0 0.0
  %2221 = vmatpush1.xpose.msra.mxu0 %v818
  %2222 = vmatprep.subr.mxu0 0.0
  %2223 = vmatpush1.xpose.msra.mxu0 %v821
  %2224 = vmatprep.subr.mxu0 0.0
  %2225 = vmatpush1.xpose.msra.mxu0 %v824
  %2226 = vmatprep.subr.mxu0 0.0
  %2227 = vmatpush1.xpose.msra.mxu0 %v827
  %2228 = vmatprep.subr.mxu0 0.0
  %2229 = vmatpush1.xpose.msra.mxu0 %v830
  %2230 = vmatprep.subr.mxu0 0.0
  %2231 = vmatpush1.xpose.msra.mxu0 %v833
  %2232 = vmatprep.subr.mxu0 0.0
  %2233 = vmatpush1.xpose.msra.mxu0 %v836
  %2234 = vmatprep.subr.mxu0 0.0
  %2235 = vmatpush1.xpose.msra.mxu0 %v839
  %2236 = vmatprep.subr.mxu0 0.0
  %2237 = vmatpush1.xpose.msra.mxu0 %v842
  %2238 = vmatprep.subr.mxu0 0.0
  %2239 = vmatpush1.xpose.msra.mxu0 %v845
  %2240 = vmatprep.subr.mxu0 0.0
  %2241 = vmatpush1.xpose.msra.mxu0 %v848
  %2242 = vmatprep.subr.mxu0 0.0
  %2243 = vmatpush1.xpose.msra.mxu0 %v851
  %2244 = vmatprep.subr.mxu0 0.0
  %2245 = vmatpush1.xpose.msra.mxu0 %v854
  %2246 = vmatprep.subr.mxu0 0.0
  %2247 = vmatpush1.xpose.msra.mxu0 %v857
  %2248 = vmatprep.subr.mxu0 0.0
  %2249 = vmatpush1.xpose.msra.mxu0 %v860
  %2250 = vmatprep.subr.mxu0 0.0
  %2251 = vmatpush1.xpose.msra.mxu0 %v863
  %2252 = vmatprep.subr.mxu0 0.0
  %2253 = vmatpush1.xpose.msra.mxu0 %v866
  %2254 = vmatprep.subr.mxu0 0.0
  %2255 = vmatpush1.xpose.msra.mxu0 %v869
  %2256 = vmatprep.subr.mxu0 0.0
  %2257 = vmatpush1.xpose.msra.mxu0 %v872
  %2258 = vmatprep.subr.mxu0 0.0
  %2259 = vmatpush1.xpose.msra.mxu0 %v875
  %2260 = vmatprep.subr.mxu0 0.0
  %2261 = vmatpush1.xpose.msra.mxu0 %v878
  %2262 = vmatprep.subr.mxu0 0.0
  %2263 = vmatpush1.xpose.msra.mxu0 %v881
  %2264 = vmatprep.subr.mxu0 0.0
  %2265 = vmatpush1.xpose.msra.mxu0 %v884
  %2266 = vmatprep.mubr.f32.mxu0 0.0
  %2267 = vmatmul.mubr.f32.gmra.mrb[0].mxu0 %v311
  %v2268 = vpop.f32.mrb[0].mxu0
  %v2269 = vadd.f32 0.0, %v2268
  %v2270 = vpop.f32.mrb[0].mxu0
  %v2271 = vadd.f32 0.0, %v2270
  %2272 = vmatprep.mubr.f32.mxu0 0.0
  %2273 = vmatmul.mubr.f32.gmra.mrb[0].mxu0 %v314
  %v2274 = vpop.f32.mrb[0].mxu0
  %v2275 = vadd.f32 0.0, %v2274
  %v2276 = vpop.f32.mrb[0].mxu0
  %v2277 = vadd.f32 0.0, %v2276
  %2278 = vmatprep.mubr.f32.mxu0 0.0
  %2279 = vmatmul.mubr.f32.gmra.mrb[0].mxu0 %v317
  %v2280 = vpop.f32.mrb[0].mxu0
  %v2281 = vadd.f32 0.0, %v2280
  %v2282 = vpop.f32.mrb[0].mxu0
  %v2283 = vadd.f32 0.0, %v2282
  %2284 = vmatprep.mubr.f32.mxu0 0.0
  %2285 = vmatmul.mubr.f32.gmra.mrb[0].mxu0 %v320
  %v2286 = vpop.f32.mrb[0].mxu0
  %v2287 = vadd.f32 0.0, %v2286
  %v2288 = vpop.f32.mrb[0].mxu0
  %v2289 = vadd.f32 0.0, %v2288
  %2290 = vmatprep.mubr.f32.mxu0 0.0
  %2291 = vmatmul.mubr.f32.gmra.mrb[0].mxu0 %v323
  %v2292 = vpop.f32.mrb[0].mxu0
  %v2293 = vadd.f32 0.0, %v2292
  %v2294 = vpop.f32.mrb[0].mxu0
  %v2295 = vadd.f32 0.0, %v2294
  %2296 = vmatprep.mubr.f32.mxu0 0.0
  %2297 = vmatmul.mubr.f32.gmra.mrb[0].mxu0 %v326
  %v2298 = vpop.f32.mrb[0].mxu0
  %v2299 = vadd.f32 0.0, %v2298
  %v2300 = vpop.f32.mrb[0].mxu0
  %v2301 = vadd.f32 0.0, %v2300
  %2302 = vmatprep.mubr.f32.mxu0 0.0
  %2303 = vmatmul.mubr.f32.gmra.mrb[0].mxu0 %v329
  %v2304 = vpop.f32.mrb[0].mxu0
  %v2305 = vadd.f32 0.0, %v2304
  %v2306 = vpop.f32.mrb[0].mxu0
  %v2307 = vadd.f32 0.0, %v2306
  %2308 = vmatprep.mubr.f32.mxu0 0.0
  %2309 = vmatmul.mubr.f32.gmra.mrb[0].mxu0 %v332
  %v2310 = vpop.f32.mrb[0].mxu0
  %v2311 = vadd.f32 0.0, %v2310
  %v2312 = vpop.f32.mrb[0].mxu0
  %v2313 = vadd.f32 0.0, %v2312
  %2314 = vmatprep.mubr.f32.mxu0 0.0
  %2315 = vmatmul.mubr.f32.gmra.mrb[0].mxu0 %v335
  %v2316 = vpop.f32.mrb[0].mxu0
  %v2317 = vadd.f32 0.0, %v2316
  %v2318 = vpop.f32.mrb[0].mxu0
  %v2319 = vadd.f32 0.0, %v2318
  %2320 = vmatprep.mubr.f32.mxu0 0.0
  %2321 = vmatmul.mubr.f32.gmra.mrb[0].mxu0 %v338
  %v2322 = vpop.f32.mrb[0].mxu0
  %v2323 = vadd.f32 0.0, %v2322
  %v2324 = vpop.f32.mrb[0].mxu0
  %v2325 = vadd.f32 0.0, %v2324
  %2326 = vmatprep.mubr.f32.mxu0 0.0
  %2327 = vmatmul.mubr.f32.gmra.mrb[0].mxu0 %v341
  %v2328 = vpop.f32.mrb[0].mxu0
  %v2329 = vadd.f32 0.0, %v2328
  %v2330 = vpop.f32.mrb[0].mxu0
  %v2331 = vadd.f32 0.0, %v2330
  %2332 = vmatprep.mubr.f32.mxu0 0.0
  %2333 = vmatmul.mubr.f32.gmra.mrb[0].mxu0 %v344
  %v2334 = vpop.f32.mrb[0].mxu0
  %v2335 = vadd.f32 0.0, %v2334
  %v2336 = vpop.f32.mrb[0].mxu0
  %v2337 = vadd.f32 0.0, %v2336
  %2338 = vmatprep.mubr.f32.mxu0 0.0
  %2339 = vmatmul.mubr.f32.gmra.mrb[0].mxu0 %v347
  %v2340 = vpop.f32.mrb[0].mxu0
  %v2341 = vadd.f32 0.0, %v2340
  %v2342 = vpop.f32.mrb[0].mxu0
  %v2343 = vadd.f32 0.0, %v2342
  %2344 = vmatprep.mubr.f32.mxu0 0.0
  %2345 = vmatmul.mubr.f32.gmra.mrb[0].mxu0 %v350
  %v2346 = vpop.f32.mrb[0].mxu0
  %v2347 = vadd.f32 0.0, %v2346
  %v2348 = vpop.f32.mrb[0].mxu0
  %v2349 = vadd.f32 0.0, %v2348
  %2350 = vmatprep.mubr.f32.mxu0 0.0
  %2351 = vmatmul.mubr.f32.gmra.mrb[0].mxu0 %v353
  %v2352 = vpop.f32.mrb[0].mxu0
  %v2353 = vadd.f32 0.0, %v2352
  %v2354 = vpop.f32.mrb[0].mxu0
  %v2355 = vadd.f32 0.0, %v2354
  %2356 = vmatprep.mubr.f32.mxu0 0.0
  %2357 = vmatmul.mubr.f32.gmra.mrb[0].mxu0 %v356
  %v2358 = vpop.f32.mrb[0].mxu0
  %v2359 = vadd.f32 0.0, %v2358
  %v2360 = vpop.f32.mrb[0].mxu0
  %v2361 = vadd.f32 0.0, %v2360
  %2362 = vmatprep.mubr.f32.mxu0 0.0
  %2363 = vmatmul.mubr.f32.gmra.mrb[0].mxu0 %v359
  %v2364 = vpop.f32.mrb[0].mxu0
  %v2365 = vadd.f32 0.0, %v2364
  %v2366 = vpop.f32.mrb[0].mxu0
  %v2367 = vadd.f32 0.0, %v2366
  %2368 = vmatprep.mubr.f32.mxu0 0.0
  %2369 = vmatmul.mubr.f32.gmra.mrb[0].mxu0 %v362
  %v2370 = vpop.f32.mrb[0].mxu0
  %v2371 = vadd.f32 0.0, %v2370
  %v2372 = vpop.f32.mrb[0].mxu0
  %v2373 = vadd.f32 0.0, %v2372
  %2374 = vmatprep.mubr.f32.mxu0 0.0
  %2375 = vmatmul.mubr.f32.gmra.mrb[0].mxu0 %v365
  %v2376 = vpop.f32.mrb[0].mxu0
  %v2377 = vadd.f32 0.0, %v2376
  %v2378 = vpop.f32.mrb[0].mxu0
  %v2379 = vadd.f32 0.0, %v2378
  %2380 = vmatprep.mubr.f32.mxu0 0.0
  %2381 = vmatmul.mubr.f32.gmra.mrb[0].mxu0 %v368
  %v2382 = vpop.f32.mrb[0].mxu0
  %v2383 = vadd.f32 0.0, %v2382
  %v2384 = vpop.f32.mrb[0].mxu0
  %v2385 = vadd.f32 0.0, %v2384
  %2386 = vmatprep.mubr.f32.mxu0 0.0
  %2387 = vmatmul.mubr.f32.gmra.mrb[0].mxu0 %v371
  %v2388 = vpop.f32.mrb[0].mxu0
  %v2389 = vadd.f32 0.0, %v2388
  %v2390 = vpop.f32.mrb[0].mxu0
  %v2391 = vadd.f32 0.0, %v2390
  %2392 = vmatprep.mubr.f32.mxu0 0.0
  %2393 = vmatmul.mubr.f32.gmra.mrb[0].mxu0 %v374
  %v2394 = vpop.f32.mrb[0].mxu0
  %v2395 = vadd.f32 0.0, %v2394
  %v2396 = vpop.f32.mrb[0].mxu0
  %v2397 = vadd.f32 0.0, %v2396
  %2398 = vmatprep.mubr.f32.mxu0 0.0
  %2399 = vmatmul.mubr.f32.gmra.mrb[0].mxu0 %v377
  %v2400 = vpop.f32.mrb[0].mxu0
  %v2401 = vadd.f32 0.0, %v2400
  %v2402 = vpop.f32.mrb[0].mxu0
  %v2403 = vadd.f32 0.0, %v2402
  %2404 = vmatprep.mubr.f32.mxu0 0.0
  %2405 = vmatmul.mubr.f32.gmra.mrb[0].mxu0 %v380
  %v2406 = vpop.f32.mrb[0].mxu0
  %v2407 = vadd.f32 0.0, %v2406
  %v2408 = vpop.f32.mrb[0].mxu0
  %v2409 = vadd.f32 0.0, %v2408
  %2410 = vmatprep.mubr.f32.mxu0 0.0
  %2411 = vmatmul.mubr.f32.gmra.mrb[0].mxu0 %v383
  %v2412 = vpop.f32.mrb[0].mxu0
  %v2413 = vadd.f32 0.0, %v2412
  %v2414 = vpop.f32.mrb[0].mxu0
  %v2415 = vadd.f32 0.0, %v2414
  %2416 = vmatprep.mubr.f32.mxu0 0.0
  %2417 = vmatmul.mubr.f32.gmra.mrb[0].mxu0 %v386
  %v2418 = vpop.f32.mrb[0].mxu0
  %v2419 = vadd.f32 0.0, %v2418
  %v2420 = vpop.f32.mrb[0].mxu0
  %v2421 = vadd.f32 0.0, %v2420
  %2422 = vmatprep.mubr.f32.mxu0 0.0
  %2423 = vmatmul.mubr.f32.gmra.mrb[0].mxu0 %v389
  %v2424 = vpop.f32.mrb[0].mxu0
  %v2425 = vadd.f32 0.0, %v2424
  %v2426 = vpop.f32.mrb[0].mxu0
  %v2427 = vadd.f32 0.0, %v2426
  %2428 = vmatprep.mubr.f32.mxu0 0.0
  %2429 = vmatmul.mubr.f32.gmra.mrb[0].mxu0 %v392
  %v2430 = vpop.f32.mrb[0].mxu0
  %v2431 = vadd.f32 0.0, %v2430
  %v2432 = vpop.f32.mrb[0].mxu0
  %v2433 = vadd.f32 0.0, %v2432
  %2434 = vmatprep.mubr.f32.mxu0 0.0
  %2435 = vmatmul.mubr.f32.gmra.mrb[0].mxu0 %v395
  %v2436 = vpop.f32.mrb[0].mxu0
  %v2437 = vadd.f32 0.0, %v2436
  %v2438 = vpop.f32.mrb[0].mxu0
  %v2439 = vadd.f32 0.0, %v2438
  %2440 = vmatprep.mubr.f32.mxu0 0.0
  %2441 = vmatmul.mubr.f32.gmra.mrb[0].mxu0 %v398
  %v2442 = vpop.f32.mrb[0].mxu0
  %v2443 = vadd.f32 0.0, %v2442
  %v2444 = vpop.f32.mrb[0].mxu0
  %v2445 = vadd.f32 0.0, %v2444
  %2446 = vmatprep.mubr.f32.mxu0 0.0
  %2447 = vmatmul.mubr.f32.gmra.mrb[0].mxu0 %v401
  %v2448 = vpop.f32.mrb[0].mxu0
  %v2449 = vadd.f32 0.0, %v2448
  %v2450 = vpop.f32.mrb[0].mxu0
  %v2451 = vadd.f32 0.0, %v2450
  %2452 = vmatprep.mubr.f32.mxu0 0.0
  %2453 = vmatmul.mubr.f32.gmra.mrb[0].mxu0 %v404
  %v2454 = vpop.f32.mrb[0].mxu0
  %v2455 = vadd.f32 0.0, %v2454
  %v2456 = vpop.f32.mrb[0].mxu0
  %v2457 = vadd.f32 0.0, %v2456
  %2458 = vdwg.mxu0
  %2459 = vmatprep.subr.mxu0 0.0
  %2460 = vmatpush1.xpose.msra.mxu0 %v887
  %2461 = vmatprep.subr.mxu0 0.0
  %2462 = vmatpush1.xpose.msra.mxu0 %v890
  %2463 = vmatprep.subr.mxu0 0.0
  %2464 = vmatpush1.xpose.msra.mxu0 %v893
  %2465 = vmatprep.subr.mxu0 0.0
  %2466 = vmatpush1.xpose.msra.mxu0 %v896
  %2467 = vmatprep.subr.mxu0 0.0
  %2468 = vmatpush1.xpose.msra.mxu0 %v899
  %2469 = vmatprep.subr.mxu0 0.0
  %2470 = vmatpush1.xpose.msra.mxu0 %v902
  %2471 = vmatprep.subr.mxu0 0.0
  %2472 = vmatpush1.xpose.msra.mxu0 %v905
  %2473 = vmatprep.subr.mxu0 0.0
  %2474 = vmatpush1.xpose.msra.mxu0 %v908
  %2475 = vmatprep.subr.mxu0 0.0
  %2476 = vmatpush1.xpose.msra.mxu0 %v911
  %2477 = vmatprep.subr.mxu0 0.0
  %2478 = vmatpush1.xpose.msra.mxu0 %v914
  %2479 = vmatprep.subr.mxu0 0.0
  %2480 = vmatpush1.xpose.msra.mxu0 %v917
  %2481 = vmatprep.subr.mxu0 0.0
  %2482 = vmatpush1.xpose.msra.mxu0 %v920
  %2483 = vmatprep.subr.mxu0 0.0
  %2484 = vmatpush1.xpose.msra.mxu0 %v923
  %2485 = vmatprep.subr.mxu0 0.0
  %2486 = vmatpush1.xpose.msra.mxu0 %v926
  %2487 = vmatprep.subr.mxu0 0.0
  %2488 = vmatpush1.xpose.msra.mxu0 %v929
  %2489 = vmatprep.subr.mxu0 0.0
  %2490 = vmatpush1.xpose.msra.mxu0 %v932
  %2491 = vmatprep.subr.mxu0 0.0
  %2492 = vmatpush1.xpose.msra.mxu0 %v935
  %2493 = vmatprep.subr.mxu0 0.0
  %2494 = vmatpush1.xpose.msra.mxu0 %v938
  %2495 = vmatprep.subr.mxu0 0.0
  %2496 = vmatpush1.xpose.msra.mxu0 %v941
  %2497 = vmatprep.subr.mxu0 0.0
  %2498 = vmatpush1.xpose.msra.mxu0 %v944
  %2499 = vmatprep.subr.mxu0 0.0
  %2500 = vmatpush1.xpose.msra.mxu0 %v947
  %2501 = vmatprep.subr.mxu0 0.0
  %2502 = vmatpush1.xpose.msra.mxu0 %v950
  %2503 = vmatprep.subr.mxu0 0.0
  %2504 = vmatpush1.xpose.msra.mxu0 %v953
  %2505 = vmatprep.subr.mxu0 0.0
  %2506 = vmatpush1.xpose.msra.mxu0 %v956
  %2507 = vmatprep.subr.mxu0 0.0
  %2508 = vmatpush1.xpose.msra.mxu0 %v959
  %2509 = vmatprep.subr.mxu0 0.0
  %2510 = vmatpush1.xpose.msra.mxu0 %v962
  %2511 = vmatprep.subr.mxu0 0.0
  %2512 = vmatpush1.xpose.msra.mxu0 %v965
  %2513 = vmatprep.subr.mxu0 0.0
  %2514 = vmatpush1.xpose.msra.mxu0 %v968
  %2515 = vmatprep.subr.mxu0 0.0
  %2516 = vmatpush1.xpose.msra.mxu0 %v971
  %2517 = vmatprep.subr.mxu0 0.0
  %2518 = vmatpush1.xpose.msra.mxu0 %v974
  %2519 = vmatprep.subr.mxu0 0.0
  %2520 = vmatpush1.xpose.msra.mxu0 %v977
  %2521 = vmatprep.subr.mxu0 0.0
  %2522 = vmatpush1.xpose.msra.mxu0 %v980
  %2523 = vmatprep.mubr.f32.mxu0 0.0
  %2524 = vmatmul.mubr.f32.gmra.mrb[0].mxu0 %v311
  %v2525 = vpop.f32.mrb[0].mxu0
  %v2526 = vadd.f32 0.0, %v2525
  %v2527 = vpop.f32.mrb[0].mxu0
  %v2528 = vadd.f32 0.0, %v2527
  %2529 = vmatprep.mubr.f32.mxu0 0.0
  %2530 = vmatmul.mubr.f32.gmra.mrb[0].mxu0 %v314
  %v2531 = vpop.f32.mrb[0].mxu0
  %v2532 = vadd.f32 0.0, %v2531
  %v2533 = vpop.f32.mrb[0].mxu0
  %v2534 = vadd.f32 0.0, %v2533
  %2535 = vmatprep.mubr.f32.mxu0 0.0
  %2536 = vmatmul.mubr.f32.gmra.mrb[0].mxu0 %v317
  %v2537 = vpop.f32.mrb[0].mxu0
  %v2538 = vadd.f32 0.0, %v2537
  %v2539 = vpop.f32.mrb[0].mxu0
  %v2540 = vadd.f32 0.0, %v2539
  %2541 = vmatprep.mubr.f32.mxu0 0.0
  %2542 = vmatmul.mubr.f32.gmra.mrb[0].mxu0 %v320
  %v2543 = vpop.f32.mrb[0].mxu0
  %v2544 = vadd.f32 0.0, %v2543
  %v2545 = vpop.f32.mrb[0].mxu0
  %v2546 = vadd.f32 0.0, %v2545
  %2547 = vmatprep.mubr.f32.mxu0 0.0
  %2548 = vmatmul.mubr.f32.gmra.mrb[0].mxu0 %v323
  %v2549 = vpop.f32.mrb[0].mxu0
  %v2550 = vadd.f32 0.0, %v2549
  %v2551 = vpop.f32.mrb[0].mxu0
  %v2552 = vadd.f32 0.0, %v2551
  %2553 = vmatprep.mubr.f32.mxu0 0.0
  %2554 = vmatmul.mubr.f32.gmra.mrb[0].mxu0 %v326
  %v2555 = vpop.f32.mrb[0].mxu0
  %v2556 = vadd.f32 0.0, %v2555
  %v2557 = vpop.f32.mrb[0].mxu0
  %v2558 = vadd.f32 0.0, %v2557
  %2559 = vmatprep.mubr.f32.mxu0 0.0
  %2560 = vmatmul.mubr.f32.gmra.mrb[0].mxu0 %v329
  %v2561 = vpop.f32.mrb[0].mxu0
  %v2562 = vadd.f32 0.0, %v2561
  %v2563 = vpop.f32.mrb[0].mxu0
  %v2564 = vadd.f32 0.0, %v2563
  %2565 = vmatprep.mubr.f32.mxu0 0.0
  %2566 = vmatmul.mubr.f32.gmra.mrb[0].mxu0 %v332
  %v2567 = vpop.f32.mrb[0].mxu0
  %v2568 = vadd.f32 0.0, %v2567
  %v2569 = vpop.f32.mrb[0].mxu0
  %v2570 = vadd.f32 0.0, %v2569
  %2571 = vmatprep.mubr.f32.mxu0 0.0
  %2572 = vmatmul.mubr.f32.gmra.mrb[0].mxu0 %v335
  %v2573 = vpop.f32.mrb[0].mxu0
  %v2574 = vadd.f32 0.0, %v2573
  %v2575 = vpop.f32.mrb[0].mxu0
  %v2576 = vadd.f32 0.0, %v2575
  %2577 = vmatprep.mubr.f32.mxu0 0.0
  %2578 = vmatmul.mubr.f32.gmra.mrb[0].mxu0 %v338
  %v2579 = vpop.f32.mrb[0].mxu0
  %v2580 = vadd.f32 0.0, %v2579
  %v2581 = vpop.f32.mrb[0].mxu0
  %v2582 = vadd.f32 0.0, %v2581
  %2583 = vmatprep.mubr.f32.mxu0 0.0
  %2584 = vmatmul.mubr.f32.gmra.mrb[0].mxu0 %v341
  %v2585 = vpop.f32.mrb[0].mxu0
  %v2586 = vadd.f32 0.0, %v2585
  %v2587 = vpop.f32.mrb[0].mxu0
  %v2588 = vadd.f32 0.0, %v2587
  %2589 = vmatprep.mubr.f32.mxu0 0.0
  %2590 = vmatmul.mubr.f32.gmra.mrb[0].mxu0 %v344
  %v2591 = vpop.f32.mrb[0].mxu0
  %v2592 = vadd.f32 0.0, %v2591
  %v2593 = vpop.f32.mrb[0].mxu0
  %v2594 = vadd.f32 0.0, %v2593
  %2595 = vmatprep.mubr.f32.mxu0 0.0
  %2596 = vmatmul.mubr.f32.gmra.mrb[0].mxu0 %v347
  %v2597 = vpop.f32.mrb[0].mxu0
  %v2598 = vadd.f32 0.0, %v2597
  %v2599 = vpop.f32.mrb[0].mxu0
  %v2600 = vadd.f32 0.0, %v2599
  %2601 = vmatprep.mubr.f32.mxu0 0.0
  %2602 = vmatmul.mubr.f32.gmra.mrb[0].mxu0 %v350
  %v2603 = vpop.f32.mrb[0].mxu0
  %v2604 = vadd.f32 0.0, %v2603
  %v2605 = vpop.f32.mrb[0].mxu0
  %v2606 = vadd.f32 0.0, %v2605
  %2607 = vmatprep.mubr.f32.mxu0 0.0
  %2608 = vmatmul.mubr.f32.gmra.mrb[0].mxu0 %v353
  %v2609 = vpop.f32.mrb[0].mxu0
  %v2610 = vadd.f32 0.0, %v2609
  %v2611 = vpop.f32.mrb[0].mxu0
  %v2612 = vadd.f32 0.0, %v2611
  %2613 = vmatprep.mubr.f32.mxu0 0.0
  %2614 = vmatmul.mubr.f32.gmra.mrb[0].mxu0 %v356
  %v2615 = vpop.f32.mrb[0].mxu0
  %v2616 = vadd.f32 0.0, %v2615
  %v2617 = vpop.f32.mrb[0].mxu0
  %v2618 = vadd.f32 0.0, %v2617
  %2619 = vmatprep.mubr.f32.mxu0 0.0
  %2620 = vmatmul.mubr.f32.gmra.mrb[0].mxu0 %v359
  %v2621 = vpop.f32.mrb[0].mxu0
  %v2622 = vadd.f32 0.0, %v2621
  %v2623 = vpop.f32.mrb[0].mxu0
  %v2624 = vadd.f32 0.0, %v2623
  %2625 = vmatprep.mubr.f32.mxu0 0.0
  %2626 = vmatmul.mubr.f32.gmra.mrb[0].mxu0 %v362
  %v2627 = vpop.f32.mrb[0].mxu0
  %v2628 = vadd.f32 0.0, %v2627
  %v2629 = vpop.f32.mrb[0].mxu0
  %v2630 = vadd.f32 0.0, %v2629
  %2631 = vmatprep.mubr.f32.mxu0 0.0
  %2632 = vmatmul.mubr.f32.gmra.mrb[0].mxu0 %v365
  %v2633 = vpop.f32.mrb[0].mxu0
  %v2634 = vadd.f32 0.0, %v2633
  %v2635 = vpop.f32.mrb[0].mxu0
  %v2636 = vadd.f32 0.0, %v2635
  %2637 = vmatprep.mubr.f32.mxu0 0.0
  %2638 = vmatmul.mubr.f32.gmra.mrb[0].mxu0 %v368
  %v2639 = vpop.f32.mrb[0].mxu0
  %v2640 = vadd.f32 0.0, %v2639
  %v2641 = vpop.f32.mrb[0].mxu0
  %v2642 = vadd.f32 0.0, %v2641
  %2643 = vmatprep.mubr.f32.mxu0 0.0
  %2644 = vmatmul.mubr.f32.gmra.mrb[0].mxu0 %v371
  %v2645 = vpop.f32.mrb[0].mxu0
  %v2646 = vadd.f32 0.0, %v2645
  %v2647 = vpop.f32.mrb[0].mxu0
  %v2648 = vadd.f32 0.0, %v2647
  %2649 = vmatprep.mubr.f32.mxu0 0.0
  %2650 = vmatmul.mubr.f32.gmra.mrb[0].mxu0 %v374
  %v2651 = vpop.f32.mrb[0].mxu0
  %v2652 = vadd.f32 0.0, %v2651
  %v2653 = vpop.f32.mrb[0].mxu0
  %v2654 = vadd.f32 0.0, %v2653
  %2655 = vmatprep.mubr.f32.mxu0 0.0
  %2656 = vmatmul.mubr.f32.gmra.mrb[0].mxu0 %v377
  %v2657 = vpop.f32.mrb[0].mxu0
  %v2658 = vadd.f32 0.0, %v2657
  %v2659 = vpop.f32.mrb[0].mxu0
  %v2660 = vadd.f32 0.0, %v2659
  %2661 = vmatprep.mubr.f32.mxu0 0.0
  %2662 = vmatmul.mubr.f32.gmra.mrb[0].mxu0 %v380
  %v2663 = vpop.f32.mrb[0].mxu0
  %v2664 = vadd.f32 0.0, %v2663
  %v2665 = vpop.f32.mrb[0].mxu0
  %v2666 = vadd.f32 0.0, %v2665
  %2667 = vmatprep.mubr.f32.mxu0 0.0
  %2668 = vmatmul.mubr.f32.gmra.mrb[0].mxu0 %v383
  %v2669 = vpop.f32.mrb[0].mxu0
  %v2670 = vadd.f32 0.0, %v2669
  %v2671 = vpop.f32.mrb[0].mxu0
  %v2672 = vadd.f32 0.0, %v2671
  %2673 = vmatprep.mubr.f32.mxu0 0.0
  %2674 = vmatmul.mubr.f32.gmra.mrb[0].mxu0 %v386
  %v2675 = vpop.f32.mrb[0].mxu0
  %v2676 = vadd.f32 0.0, %v2675
  %v2677 = vpop.f32.mrb[0].mxu0
  %v2678 = vadd.f32 0.0, %v2677
  %2679 = vmatprep.mubr.f32.mxu0 0.0
  %2680 = vmatmul.mubr.f32.gmra.mrb[0].mxu0 %v389
  %v2681 = vpop.f32.mrb[0].mxu0
  %v2682 = vadd.f32 0.0, %v2681
  %v2683 = vpop.f32.mrb[0].mxu0
  %v2684 = vadd.f32 0.0, %v2683
  %2685 = vmatprep.mubr.f32.mxu0 0.0
  %2686 = vmatmul.mubr.f32.gmra.mrb[0].mxu0 %v392
  %v2687 = vpop.f32.mrb[0].mxu0
  %v2688 = vadd.f32 0.0, %v2687
  %v2689 = vpop.f32.mrb[0].mxu0
  %v2690 = vadd.f32 0.0, %v2689
  %2691 = vmatprep.mubr.f32.mxu0 0.0
  %2692 = vmatmul.mubr.f32.gmra.mrb[0].mxu0 %v395
  %v2693 = vpop.f32.mrb[0].mxu0
  %v2694 = vadd.f32 0.0, %v2693
  %v2695 = vpop.f32.mrb[0].mxu0
  %v2696 = vadd.f32 0.0, %v2695
  %2697 = vmatprep.mubr.f32.mxu0 0.0
  %2698 = vmatmul.mubr.f32.gmra.mrb[0].mxu0 %v398
  %v2699 = vpop.f32.mrb[0].mxu0
  %v2700 = vadd.f32 0.0, %v2699
  %v2701 = vpop.f32.mrb[0].mxu0
  %v2702 = vadd.f32 0.0, %v2701
  %2703 = vmatprep.mubr.f32.mxu0 0.0
  %2704 = vmatmul.mubr.f32.gmra.mrb[0].mxu0 %v401
  %v2705 = vpop.f32.mrb[0].mxu0
  %v2706 = vadd.f32 0.0, %v2705
  %v2707 = vpop.f32.mrb[0].mxu0
  %v2708 = vadd.f32 0.0, %v2707
  %2709 = vmatprep.mubr.f32.mxu0 0.0
  %2710 = vmatmul.mubr.f32.gmra.mrb[0].mxu0 %v404
  %v2711 = vpop.f32.mrb[0].mxu0
  %v2712 = vadd.f32 0.0, %v2711
  %v2713 = vpop.f32.mrb[0].mxu0
  %v2714 = vadd.f32 0.0, %v2713
  %2715 = vdwg.mxu0
  %2716 = vmatprep.subr.mxu0 0.0
  %2717 = vmatpush1.xpose.msra.mxu0 %v983
  %2718 = vmatprep.subr.mxu0 0.0
  %2719 = vmatpush1.xpose.msra.mxu0 %v986
  %2720 = vmatprep.subr.mxu0 0.0
  %2721 = vmatpush1.xpose.msra.mxu0 %v989
  %2722 = vmatprep.subr.mxu0 0.0
  %2723 = vmatpush1.xpose.msra.mxu0 %v992
  %2724 = vmatprep.subr.mxu0 0.0
  %2725 = vmatpush1.xpose.msra.mxu0 %v995
  %2726 = vmatprep.subr.mxu0 0.0
  %2727 = vmatpush1.xpose.msra.mxu0 %v998
  %2728 = vmatprep.subr.mxu0 0.0
  %2729 = vmatpush1.xpose.msra.mxu0 %v1001
  %2730 = vmatprep.subr.mxu0 0.0
  %2731 = vmatpush1.xpose.msra.mxu0 %v1004
  %2732 = vmatprep.subr.mxu0 0.0
  %2733 = vmatpush1.xpose.msra.mxu0 %v1007
  %2734 = vmatprep.subr.mxu0 0.0
  %2735 = vmatpush1.xpose.msra.mxu0 %v1010
  %2736 = vmatprep.subr.mxu0 0.0
  %2737 = vmatpush1.xpose.msra.mxu0 %v1013
  %2738 = vmatprep.subr.mxu0 0.0
  %2739 = vmatpush1.xpose.msra.mxu0 %v1016
  %2740 = vmatprep.subr.mxu0 0.0
  %2741 = vmatpush1.xpose.msra.mxu0 %v1019
  %2742 = vmatprep.subr.mxu0 0.0
  %2743 = vmatpush1.xpose.msra.mxu0 %v1022
  %2744 = vmatprep.subr.mxu0 0.0
  %2745 = vmatpush1.xpose.msra.mxu0 %v1025
  %2746 = vmatprep.subr.mxu0 0.0
  %2747 = vmatpush1.xpose.msra.mxu0 %v1028
  %2748 = vmatprep.subr.mxu0 0.0
  %2749 = vmatpush1.xpose.msra.mxu0 %v1031
  %2750 = vmatprep.subr.mxu0 0.0
  %2751 = vmatpush1.xpose.msra.mxu0 %v1034
  %2752 = vmatprep.subr.mxu0 0.0
  %2753 = vmatpush1.xpose.msra.mxu0 %v1037
  %2754 = vmatprep.subr.mxu0 0.0
  %2755 = vmatpush1.xpose.msra.mxu0 %v1040
  %2756 = vmatprep.subr.mxu0 0.0
  %2757 = vmatpush1.xpose.msra.mxu0 %v1043
  %2758 = vmatprep.subr.mxu0 0.0
  %2759 = vmatpush1.xpose.msra.mxu0 %v1046
  %2760 = vmatprep.subr.mxu0 0.0
  %2761 = vmatpush1.xpose.msra.mxu0 %v1049
  %2762 = vmatprep.subr.mxu0 0.0
  %2763 = vmatpush1.xpose.msra.mxu0 %v1052
  %2764 = vmatprep.subr.mxu0 0.0
  %2765 = vmatpush1.xpose.msra.mxu0 %v1055
  %2766 = vmatprep.subr.mxu0 0.0
  %2767 = vmatpush1.xpose.msra.mxu0 %v1058
  %2768 = vmatprep.subr.mxu0 0.0
  %2769 = vmatpush1.xpose.msra.mxu0 %v1061
  %2770 = vmatprep.subr.mxu0 0.0
  %2771 = vmatpush1.xpose.msra.mxu0 %v1064
  %2772 = vmatprep.subr.mxu0 0.0
  %2773 = vmatpush1.xpose.msra.mxu0 %v1067
  %2774 = vmatprep.subr.mxu0 0.0
  %2775 = vmatpush1.xpose.msra.mxu0 %v1070
  %2776 = vmatprep.subr.mxu0 0.0
  %2777 = vmatpush1.xpose.msra.mxu0 %v1073
  %2778 = vmatprep.subr.mxu0 0.0
  %2779 = vmatpush1.xpose.msra.mxu0 %v1076
  %2780 = vmatprep.mubr.f32.mxu0 0.0
  %2781 = vmatmul.mubr.f32.gmra.mrb[0].mxu0 %v311
  %v2782 = vpop.f32.mrb[0].mxu0
  %v2783 = vadd.f32 0.0, %v2782
  %v2784 = vpop.f32.mrb[0].mxu0
  %v2785 = vadd.f32 0.0, %v2784
  %2786 = vmatprep.mubr.f32.mxu0 0.0
  %2787 = vmatmul.mubr.f32.gmra.mrb[0].mxu0 %v314
  %v2788 = vpop.f32.mrb[0].mxu0
  %v2789 = vadd.f32 0.0, %v2788
  %v2790 = vpop.f32.mrb[0].mxu0
  %v2791 = vadd.f32 0.0, %v2790
  %2792 = vmatprep.mubr.f32.mxu0 0.0
  %2793 = vmatmul.mubr.f32.gmra.mrb[0].mxu0 %v317
  %v2794 = vpop.f32.mrb[0].mxu0
  %v2795 = vadd.f32 0.0, %v2794
  %v2796 = vpop.f32.mrb[0].mxu0
  %v2797 = vadd.f32 0.0, %v2796
  %2798 = vmatprep.mubr.f32.mxu0 0.0
  %2799 = vmatmul.mubr.f32.gmra.mrb[0].mxu0 %v320
  %v2800 = vpop.f32.mrb[0].mxu0
  %v2801 = vadd.f32 0.0, %v2800
  %v2802 = vpop.f32.mrb[0].mxu0
  %v2803 = vadd.f32 0.0, %v2802
  %2804 = vmatprep.mubr.f32.mxu0 0.0
  %2805 = vmatmul.mubr.f32.gmra.mrb[0].mxu0 %v323
  %v2806 = vpop.f32.mrb[0].mxu0
  %v2807 = vadd.f32 0.0, %v2806
  %v2808 = vpop.f32.mrb[0].mxu0
  %v2809 = vadd.f32 0.0, %v2808
  %2810 = vmatprep.mubr.f32.mxu0 0.0
  %2811 = vmatmul.mubr.f32.gmra.mrb[0].mxu0 %v326
  %v2812 = vpop.f32.mrb[0].mxu0
  %v2813 = vadd.f32 0.0, %v2812
  %v2814 = vpop.f32.mrb[0].mxu0
  %v2815 = vadd.f32 0.0, %v2814
  %2816 = vmatprep.mubr.f32.mxu0 0.0
  %2817 = vmatmul.mubr.f32.gmra.mrb[0].mxu0 %v329
  %v2818 = vpop.f32.mrb[0].mxu0
  %v2819 = vadd.f32 0.0, %v2818
  %v2820 = vpop.f32.mrb[0].mxu0
  %v2821 = vadd.f32 0.0, %v2820
  %2822 = vmatprep.mubr.f32.mxu0 0.0
  %2823 = vmatmul.mubr.f32.gmra.mrb[0].mxu0 %v332
  %v2824 = vpop.f32.mrb[0].mxu0
  %v2825 = vadd.f32 0.0, %v2824
  %v2826 = vpop.f32.mrb[0].mxu0
  %v2827 = vadd.f32 0.0, %v2826
  %2828 = vmatprep.mubr.f32.mxu0 0.0
  %2829 = vmatmul.mubr.f32.gmra.mrb[0].mxu0 %v335
  %v2830 = vpop.f32.mrb[0].mxu0
  %v2831 = vadd.f32 0.0, %v2830
  %v2832 = vpop.f32.mrb[0].mxu0
  %v2833 = vadd.f32 0.0, %v2832
  %2834 = vmatprep.mubr.f32.mxu0 0.0
  %2835 = vmatmul.mubr.f32.gmra.mrb[0].mxu0 %v338
  %v2836 = vpop.f32.mrb[0].mxu0
  %v2837 = vadd.f32 0.0, %v2836
  %v2838 = vpop.f32.mrb[0].mxu0
  %v2839 = vadd.f32 0.0, %v2838
  %2840 = vmatprep.mubr.f32.mxu0 0.0
  %2841 = vmatmul.mubr.f32.gmra.mrb[0].mxu0 %v341
  %v2842 = vpop.f32.mrb[0].mxu0
  %v2843 = vadd.f32 0.0, %v2842
  %v2844 = vpop.f32.mrb[0].mxu0
  %v2845 = vadd.f32 0.0, %v2844
  %2846 = vmatprep.mubr.f32.mxu0 0.0
  %2847 = vmatmul.mubr.f32.gmra.mrb[0].mxu0 %v344
  %v2848 = vpop.f32.mrb[0].mxu0
  %v2849 = vadd.f32 0.0, %v2848
  %v2850 = vpop.f32.mrb[0].mxu0
  %v2851 = vadd.f32 0.0, %v2850
  %2852 = vmatprep.mubr.f32.mxu0 0.0
  %2853 = vmatmul.mubr.f32.gmra.mrb[0].mxu0 %v347
  %v2854 = vpop.f32.mrb[0].mxu0
  %v2855 = vadd.f32 0.0, %v2854
  %v2856 = vpop.f32.mrb[0].mxu0
  %v2857 = vadd.f32 0.0, %v2856
  %2858 = vmatprep.mubr.f32.mxu0 0.0
  %2859 = vmatmul.mubr.f32.gmra.mrb[0].mxu0 %v350
  %v2860 = vpop.f32.mrb[0].mxu0
  %v2861 = vadd.f32 0.0, %v2860
  %v2862 = vpop.f32.mrb[0].mxu0
  %v2863 = vadd.f32 0.0, %v2862
  %2864 = vmatprep.mubr.f32.mxu0 0.0
  %2865 = vmatmul.mubr.f32.gmra.mrb[0].mxu0 %v353
  %v2866 = vpop.f32.mrb[0].mxu0
  %v2867 = vadd.f32 0.0, %v2866
  %v2868 = vpop.f32.mrb[0].mxu0
  %v2869 = vadd.f32 0.0, %v2868
  %2870 = vmatprep.mubr.f32.mxu0 0.0
  %2871 = vmatmul.mubr.f32.gmra.mrb[0].mxu0 %v356
  %v2872 = vpop.f32.mrb[0].mxu0
  %v2873 = vadd.f32 0.0, %v2872
  %v2874 = vpop.f32.mrb[0].mxu0
  %v2875 = vadd.f32 0.0, %v2874
  %2876 = vmatprep.mubr.f32.mxu0 0.0
  %2877 = vmatmul.mubr.f32.gmra.mrb[0].mxu0 %v359
  %v2878 = vpop.f32.mrb[0].mxu0
  %v2879 = vadd.f32 0.0, %v2878
  %v2880 = vpop.f32.mrb[0].mxu0
  %v2881 = vadd.f32 0.0, %v2880
  %2882 = vmatprep.mubr.f32.mxu0 0.0
  %2883 = vmatmul.mubr.f32.gmra.mrb[0].mxu0 %v362
  %v2884 = vpop.f32.mrb[0].mxu0
  %v2885 = vadd.f32 0.0, %v2884
  %v2886 = vpop.f32.mrb[0].mxu0
  %v2887 = vadd.f32 0.0, %v2886
  %2888 = vmatprep.mubr.f32.mxu0 0.0
  %2889 = vmatmul.mubr.f32.gmra.mrb[0].mxu0 %v365
  %v2890 = vpop.f32.mrb[0].mxu0
  %v2891 = vadd.f32 0.0, %v2890
  %v2892 = vpop.f32.mrb[0].mxu0
  %v2893 = vadd.f32 0.0, %v2892
  %2894 = vmatprep.mubr.f32.mxu0 0.0
  %2895 = vmatmul.mubr.f32.gmra.mrb[0].mxu0 %v368
  %v2896 = vpop.f32.mrb[0].mxu0
  %v2897 = vadd.f32 0.0, %v2896
  %v2898 = vpop.f32.mrb[0].mxu0
  %v2899 = vadd.f32 0.0, %v2898
  %2900 = vmatprep.mubr.f32.mxu0 0.0
  %2901 = vmatmul.mubr.f32.gmra.mrb[0].mxu0 %v371
  %v2902 = vpop.f32.mrb[0].mxu0
  %v2903 = vadd.f32 0.0, %v2902
  %v2904 = vpop.f32.mrb[0].mxu0
  %v2905 = vadd.f32 0.0, %v2904
  %2906 = vmatprep.mubr.f32.mxu0 0.0
  %2907 = vmatmul.mubr.f32.gmra.mrb[0].mxu0 %v374
  %v2908 = vpop.f32.mrb[0].mxu0
  %v2909 = vadd.f32 0.0, %v2908
  %v2910 = vpop.f32.mrb[0].mxu0
  %v2911 = vadd.f32 0.0, %v2910
  %2912 = vmatprep.mubr.f32.mxu0 0.0
  %2913 = vmatmul.mubr.f32.gmra.mrb[0].mxu0 %v377
  %v2914 = vpop.f32.mrb[0].mxu0
  %v2915 = vadd.f32 0.0, %v2914
  %v2916 = vpop.f32.mrb[0].mxu0
  %v2917 = vadd.f32 0.0, %v2916
  %2918 = vmatprep.mubr.f32.mxu0 0.0
  %2919 = vmatmul.mubr.f32.gmra.mrb[0].mxu0 %v380
  %v2920 = vpop.f32.mrb[0].mxu0
  %v2921 = vadd.f32 0.0, %v2920
  %v2922 = vpop.f32.mrb[0].mxu0
  %v2923 = vadd.f32 0.0, %v2922
  %2924 = vmatprep.mubr.f32.mxu0 0.0
  %2925 = vmatmul.mubr.f32.gmra.mrb[0].mxu0 %v383
  %v2926 = vpop.f32.mrb[0].mxu0
  %v2927 = vadd.f32 0.0, %v2926
  %v2928 = vpop.f32.mrb[0].mxu0
  %v2929 = vadd.f32 0.0, %v2928
  %2930 = vmatprep.mubr.f32.mxu0 0.0
  %2931 = vmatmul.mubr.f32.gmra.mrb[0].mxu0 %v386
  %v2932 = vpop.f32.mrb[0].mxu0
  %v2933 = vadd.f32 0.0, %v2932
  %v2934 = vpop.f32.mrb[0].mxu0
  %v2935 = vadd.f32 0.0, %v2934
  %2936 = vmatprep.mubr.f32.mxu0 0.0
  %2937 = vmatmul.mubr.f32.gmra.mrb[0].mxu0 %v389
  %v2938 = vpop.f32.mrb[0].mxu0
  %v2939 = vadd.f32 0.0, %v2938
  %v2940 = vpop.f32.mrb[0].mxu0
  %v2941 = vadd.f32 0.0, %v2940
  %2942 = vmatprep.mubr.f32.mxu0 0.0
  %2943 = vmatmul.mubr.f32.gmra.mrb[0].mxu0 %v392
  %v2944 = vpop.f32.mrb[0].mxu0
  %v2945 = vadd.f32 0.0, %v2944
  %v2946 = vpop.f32.mrb[0].mxu0
  %v2947 = vadd.f32 0.0, %v2946
  %2948 = vmatprep.mubr.f32.mxu0 0.0
  %2949 = vmatmul.mubr.f32.gmra.mrb[0].mxu0 %v395
  %v2950 = vpop.f32.mrb[0].mxu0
  %v2951 = vadd.f32 0.0, %v2950
  %v2952 = vpop.f32.mrb[0].mxu0
  %v2953 = vadd.f32 0.0, %v2952
  %2954 = vmatprep.mubr.f32.mxu0 0.0
  %2955 = vmatmul.mubr.f32.gmra.mrb[0].mxu0 %v398
  %v2956 = vpop.f32.mrb[0].mxu0
  %v2957 = vadd.f32 0.0, %v2956
  %v2958 = vpop.f32.mrb[0].mxu0
  %v2959 = vadd.f32 0.0, %v2958
  %2960 = vmatprep.mubr.f32.mxu0 0.0
  %2961 = vmatmul.mubr.f32.gmra.mrb[0].mxu0 %v401
  %v2962 = vpop.f32.mrb[0].mxu0
  %v2963 = vadd.f32 0.0, %v2962
  %v2964 = vpop.f32.mrb[0].mxu0
  %v2965 = vadd.f32 0.0, %v2964
  %2966 = vmatprep.mubr.f32.mxu0 0.0
  %2967 = vmatmul.mubr.f32.gmra.mrb[0].mxu0 %v404
  %v2968 = vpop.f32.mrb[0].mxu0
  %v2969 = vadd.f32 0.0, %v2968
  %v2970 = vpop.f32.mrb[0].mxu0
  %v2971 = vadd.f32 0.0, %v2970
  %2972 = vdwg.mxu0
  %2973 = vmatprep.subr.mxu0 0.0
  %2974 = vmatpush1.xpose.msra.mxu0 %v1079
  %2975 = vmatprep.subr.mxu0 0.0
  %2976 = vmatpush1.xpose.msra.mxu0 %v1082
  %2977 = vmatprep.subr.mxu0 0.0
  %2978 = vmatpush1.xpose.msra.mxu0 %v1085
  %2979 = vmatprep.subr.mxu0 0.0
  %2980 = vmatpush1.xpose.msra.mxu0 %v1088
  %2981 = vmatprep.subr.mxu0 0.0
  %2982 = vmatpush1.xpose.msra.mxu0 %v1091
  %2983 = vmatprep.subr.mxu0 0.0
  %2984 = vmatpush1.xpose.msra.mxu0 %v1094
  %2985 = vmatprep.subr.mxu0 0.0
  %2986 = vmatpush1.xpose.msra.mxu0 %v1097
  %2987 = vmatprep.subr.mxu0 0.0
  %2988 = vmatpush1.xpose.msra.mxu0 %v1100
  %2989 = vmatprep.subr.mxu0 0.0
  %2990 = vmatpush1.xpose.msra.mxu0 %v1103
  %2991 = vmatprep.subr.mxu0 0.0
  %2992 = vmatpush1.xpose.msra.mxu0 %v1106
  %2993 = vmatprep.subr.mxu0 0.0
  %2994 = vmatpush1.xpose.msra.mxu0 %v1109
  %2995 = vmatprep.subr.mxu0 0.0
  %2996 = vmatpush1.xpose.msra.mxu0 %v1112
  %2997 = vmatprep.subr.mxu0 0.0
  %2998 = vmatpush1.xpose.msra.mxu0 %v1115
  %2999 = vmatprep.subr.mxu0 0.0
  %3000 = vmatpush1.xpose.msra.mxu0 %v1118
  %3001 = vmatprep.subr.mxu0 0.0
  %3002 = vmatpush1.xpose.msra.mxu0 %v1121
  %3003 = vmatprep.subr.mxu0 0.0
  %3004 = vmatpush1.xpose.msra.mxu0 %v1124
  %3005 = vmatprep.subr.mxu0 0.0
  %3006 = vmatpush1.xpose.msra.mxu0 %v1127
  %3007 = vmatprep.subr.mxu0 0.0
  %3008 = vmatpush1.xpose.msra.mxu0 %v1130
  %3009 = vmatprep.subr.mxu0 0.0
  %3010 = vmatpush1.xpose.msra.mxu0 %v1133
  %3011 = vmatprep.subr.mxu0 0.0
  %3012 = vmatpush1.xpose.msra.mxu0 %v1136
  %3013 = vmatprep.subr.mxu0 0.0
  %3014 = vmatpush1.xpose.msra.mxu0 %v1139
  %3015 = vmatprep.subr.mxu0 0.0
  %3016 = vmatpush1.xpose.msra.mxu0 %v1142
  %3017 = vmatprep.subr.mxu0 0.0
  %3018 = vmatpush1.xpose.msra.mxu0 %v1145
  %3019 = vmatprep.subr.mxu0 0.0
  %3020 = vmatpush1.xpose.msra.mxu0 %v1148
  %3021 = vmatprep.subr.mxu0 0.0
  %3022 = vmatpush1.xpose.msra.mxu0 %v1151
  %3023 = vmatprep.subr.mxu0 0.0
  %3024 = vmatpush1.xpose.msra.mxu0 %v1154
  %3025 = vmatprep.subr.mxu0 0.0
  %3026 = vmatpush1.xpose.msra.mxu0 %v1157
  %3027 = vmatprep.subr.mxu0 0.0
  %3028 = vmatpush1.xpose.msra.mxu0 %v1160
  %3029 = vmatprep.subr.mxu0 0.0
  %3030 = vmatpush1.xpose.msra.mxu0 %v1163
  %3031 = vmatprep.subr.mxu0 0.0
  %3032 = vmatpush1.xpose.msra.mxu0 %v1166
  %3033 = vmatprep.subr.mxu0 0.0
  %3034 = vmatpush1.xpose.msra.mxu0 %v1169
  %3035 = vmatprep.subr.mxu0 0.0
  %3036 = vmatpush1.xpose.msra.mxu0 %v1172
  %3037 = vmatprep.mubr.f32.mxu0 0.0
  %3038 = vmatmul.mubr.f32.gmra.mrb[0].mxu0 %v311
  %v3039 = vpop.f32.mrb[0].mxu0
  %v3040 = vadd.f32 0.0, %v3039
  %v3041 = vpop.f32.mrb[0].mxu0
  %v3042 = vadd.f32 0.0, %v3041
  %3043 = vmatprep.mubr.f32.mxu0 0.0
  %3044 = vmatmul.mubr.f32.gmra.mrb[0].mxu0 %v314
  %v3045 = vpop.f32.mrb[0].mxu0
  %v3046 = vadd.f32 0.0, %v3045
  %v3047 = vpop.f32.mrb[0].mxu0
  %v3048 = vadd.f32 0.0, %v3047
  %3049 = vmatprep.mubr.f32.mxu0 0.0
  %3050 = vmatmul.mubr.f32.gmra.mrb[0].mxu0 %v317
  %v3051 = vpop.f32.mrb[0].mxu0
  %v3052 = vadd.f32 0.0, %v3051
  %v3053 = vpop.f32.mrb[0].mxu0
  %v3054 = vadd.f32 0.0, %v3053
  %3055 = vmatprep.mubr.f32.mxu0 0.0
  %3056 = vmatmul.mubr.f32.gmra.mrb[0].mxu0 %v320
  %v3057 = vpop.f32.mrb[0].mxu0
  %v3058 = vadd.f32 0.0, %v3057
  %v3059 = vpop.f32.mrb[0].mxu0
  %v3060 = vadd.f32 0.0, %v3059
  %3061 = vmatprep.mubr.f32.mxu0 0.0
  %3062 = vmatmul.mubr.f32.gmra.mrb[0].mxu0 %v323
  %v3063 = vpop.f32.mrb[0].mxu0
  %v3064 = vadd.f32 0.0, %v3063
  %v3065 = vpop.f32.mrb[0].mxu0
  %v3066 = vadd.f32 0.0, %v3065
  %3067 = vmatprep.mubr.f32.mxu0 0.0
  %3068 = vmatmul.mubr.f32.gmra.mrb[0].mxu0 %v326
  %v3069 = vpop.f32.mrb[0].mxu0
  %v3070 = vadd.f32 0.0, %v3069
  %v3071 = vpop.f32.mrb[0].mxu0
  %v3072 = vadd.f32 0.0, %v3071
  %3073 = vmatprep.mubr.f32.mxu0 0.0
  %3074 = vmatmul.mubr.f32.gmra.mrb[0].mxu0 %v329
  %v3075 = vpop.f32.mrb[0].mxu0
  %v3076 = vadd.f32 0.0, %v3075
  %v3077 = vpop.f32.mrb[0].mxu0
  %v3078 = vadd.f32 0.0, %v3077
  %3079 = vmatprep.mubr.f32.mxu0 0.0
  %3080 = vmatmul.mubr.f32.gmra.mrb[0].mxu0 %v332
  %v3081 = vpop.f32.mrb[0].mxu0
  %v3082 = vadd.f32 0.0, %v3081
  %v3083 = vpop.f32.mrb[0].mxu0
  %v3084 = vadd.f32 0.0, %v3083
  %3085 = vmatprep.mubr.f32.mxu0 0.0
  %3086 = vmatmul.mubr.f32.gmra.mrb[0].mxu0 %v335
  %v3087 = vpop.f32.mrb[0].mxu0
  %v3088 = vadd.f32 0.0, %v3087
  %v3089 = vpop.f32.mrb[0].mxu0
  %v3090 = vadd.f32 0.0, %v3089
  %3091 = vmatprep.mubr.f32.mxu0 0.0
  %3092 = vmatmul.mubr.f32.gmra.mrb[0].mxu0 %v338
  %v3093 = vpop.f32.mrb[0].mxu0
  %v3094 = vadd.f32 0.0, %v3093
  %v3095 = vpop.f32.mrb[0].mxu0
  %v3096 = vadd.f32 0.0, %v3095
  %3097 = vmatprep.mubr.f32.mxu0 0.0
  %3098 = vmatmul.mubr.f32.gmra.mrb[0].mxu0 %v341
  %v3099 = vpop.f32.mrb[0].mxu0
  %v3100 = vadd.f32 0.0, %v3099
  %v3101 = vpop.f32.mrb[0].mxu0
  %v3102 = vadd.f32 0.0, %v3101
  %3103 = vmatprep.mubr.f32.mxu0 0.0
  %3104 = vmatmul.mubr.f32.gmra.mrb[0].mxu0 %v344
  %v3105 = vpop.f32.mrb[0].mxu0
  %v3106 = vadd.f32 0.0, %v3105
  %v3107 = vpop.f32.mrb[0].mxu0
  %v3108 = vadd.f32 0.0, %v3107
  %3109 = vmatprep.mubr.f32.mxu0 0.0
  %3110 = vmatmul.mubr.f32.gmra.mrb[0].mxu0 %v347
  %v3111 = vpop.f32.mrb[0].mxu0
  %v3112 = vadd.f32 0.0, %v3111
  %v3113 = vpop.f32.mrb[0].mxu0
  %v3114 = vadd.f32 0.0, %v3113
  %3115 = vmatprep.mubr.f32.mxu0 0.0
  %3116 = vmatmul.mubr.f32.gmra.mrb[0].mxu0 %v350
  %v3117 = vpop.f32.mrb[0].mxu0
  %v3118 = vadd.f32 0.0, %v3117
  %v3119 = vpop.f32.mrb[0].mxu0
  %v3120 = vadd.f32 0.0, %v3119
  %3121 = vmatprep.mubr.f32.mxu0 0.0
  %3122 = vmatmul.mubr.f32.gmra.mrb[0].mxu0 %v353
  %v3123 = vpop.f32.mrb[0].mxu0
  %v3124 = vadd.f32 0.0, %v3123
  %v3125 = vpop.f32.mrb[0].mxu0
  %v3126 = vadd.f32 0.0, %v3125
  %3127 = vmatprep.mubr.f32.mxu0 0.0
  %3128 = vmatmul.mubr.f32.gmra.mrb[0].mxu0 %v356
  %v3129 = vpop.f32.mrb[0].mxu0
  %v3130 = vadd.f32 0.0, %v3129
  %v3131 = vpop.f32.mrb[0].mxu0
  %v3132 = vadd.f32 0.0, %v3131
  %3133 = vmatprep.mubr.f32.mxu0 0.0
  %3134 = vmatmul.mubr.f32.gmra.mrb[0].mxu0 %v359
  %v3135 = vpop.f32.mrb[0].mxu0
  %v3136 = vadd.f32 0.0, %v3135
  %v3137 = vpop.f32.mrb[0].mxu0
  %v3138 = vadd.f32 0.0, %v3137
  %3139 = vmatprep.mubr.f32.mxu0 0.0
  %3140 = vmatmul.mubr.f32.gmra.mrb[0].mxu0 %v362
  %v3141 = vpop.f32.mrb[0].mxu0
  %v3142 = vadd.f32 0.0, %v3141
  %v3143 = vpop.f32.mrb[0].mxu0
  %v3144 = vadd.f32 0.0, %v3143
  %3145 = vmatprep.mubr.f32.mxu0 0.0
  %3146 = vmatmul.mubr.f32.gmra.mrb[0].mxu0 %v365
  %v3147 = vpop.f32.mrb[0].mxu0
  %v3148 = vadd.f32 0.0, %v3147
  %v3149 = vpop.f32.mrb[0].mxu0
  %v3150 = vadd.f32 0.0, %v3149
  %3151 = vmatprep.mubr.f32.mxu0 0.0
  %3152 = vmatmul.mubr.f32.gmra.mrb[0].mxu0 %v368
  %v3153 = vpop.f32.mrb[0].mxu0
  %v3154 = vadd.f32 0.0, %v3153
  %v3155 = vpop.f32.mrb[0].mxu0
  %v3156 = vadd.f32 0.0, %v3155
  %3157 = vmatprep.mubr.f32.mxu0 0.0
  %3158 = vmatmul.mubr.f32.gmra.mrb[0].mxu0 %v371
  %v3159 = vpop.f32.mrb[0].mxu0
  %v3160 = vadd.f32 0.0, %v3159
  %v3161 = vpop.f32.mrb[0].mxu0
  %v3162 = vadd.f32 0.0, %v3161
  %3163 = vmatprep.mubr.f32.mxu0 0.0
  %3164 = vmatmul.mubr.f32.gmra.mrb[0].mxu0 %v374
  %v3165 = vpop.f32.mrb[0].mxu0
  %v3166 = vadd.f32 0.0, %v3165
  %v3167 = vpop.f32.mrb[0].mxu0
  %v3168 = vadd.f32 0.0, %v3167
  %3169 = vmatprep.mubr.f32.mxu0 0.0
  %3170 = vmatmul.mubr.f32.gmra.mrb[0].mxu0 %v377
  %v3171 = vpop.f32.mrb[0].mxu0
  %v3172 = vadd.f32 0.0, %v3171
  %v3173 = vpop.f32.mrb[0].mxu0
  %v3174 = vadd.f32 0.0, %v3173
  %3175 = vmatprep.mubr.f32.mxu0 0.0
  %3176 = vmatmul.mubr.f32.gmra.mrb[0].mxu0 %v380
  %v3177 = vpop.f32.mrb[0].mxu0
  %v3178 = vadd.f32 0.0, %v3177
  %v3179 = vpop.f32.mrb[0].mxu0
  %v3180 = vadd.f32 0.0, %v3179
  %3181 = vmatprep.mubr.f32.mxu0 0.0
  %3182 = vmatmul.mubr.f32.gmra.mrb[0].mxu0 %v383
  %v3183 = vpop.f32.mrb[0].mxu0
  %v3184 = vadd.f32 0.0, %v3183
  %v3185 = vpop.f32.mrb[0].mxu0
  %v3186 = vadd.f32 0.0, %v3185
  %3187 = vmatprep.mubr.f32.mxu0 0.0
  %3188 = vmatmul.mubr.f32.gmra.mrb[0].mxu0 %v386
  %v3189 = vpop.f32.mrb[0].mxu0
  %v3190 = vadd.f32 0.0, %v3189
  %v3191 = vpop.f32.mrb[0].mxu0
  %v3192 = vadd.f32 0.0, %v3191
  %3193 = vmatprep.mubr.f32.mxu0 0.0
  %3194 = vmatmul.mubr.f32.gmra.mrb[0].mxu0 %v389
  %v3195 = vpop.f32.mrb[0].mxu0
  %v3196 = vadd.f32 0.0, %v3195
  %v3197 = vpop.f32.mrb[0].mxu0
  %v3198 = vadd.f32 0.0, %v3197
  %3199 = vmatprep.mubr.f32.mxu0 0.0
  %3200 = vmatmul.mubr.f32.gmra.mrb[0].mxu0 %v392
  %v3201 = vpop.f32.mrb[0].mxu0
  %v3202 = vadd.f32 0.0, %v3201
  %v3203 = vpop.f32.mrb[0].mxu0
  %v3204 = vadd.f32 0.0, %v3203
  %3205 = vmatprep.mubr.f32.mxu0 0.0
  %3206 = vmatmul.mubr.f32.gmra.mrb[0].mxu0 %v395
  %v3207 = vpop.f32.mrb[0].mxu0
  %v3208 = vadd.f32 0.0, %v3207
  %v3209 = vpop.f32.mrb[0].mxu0
  %v3210 = vadd.f32 0.0, %v3209
  %3211 = vmatprep.mubr.f32.mxu0 0.0
  %3212 = vmatmul.mubr.f32.gmra.mrb[0].mxu0 %v398
  %v3213 = vpop.f32.mrb[0].mxu0
  %v3214 = vadd.f32 0.0, %v3213
  %v3215 = vpop.f32.mrb[0].mxu0
  %v3216 = vadd.f32 0.0, %v3215
  %3217 = vmatprep.mubr.f32.mxu0 0.0
  %3218 = vmatmul.mubr.f32.gmra.mrb[0].mxu0 %v401
  %v3219 = vpop.f32.mrb[0].mxu0
  %v3220 = vadd.f32 0.0, %v3219
  %v3221 = vpop.f32.mrb[0].mxu0
  %v3222 = vadd.f32 0.0, %v3221
  %3223 = vmatprep.mubr.f32.mxu0 0.0
  %3224 = vmatmul.mubr.f32.gmra.mrb[0].mxu0 %v404
  %v3225 = vpop.f32.mrb[0].mxu0
  %v3226 = vadd.f32 0.0, %v3225
  %v3227 = vpop.f32.mrb[0].mxu0
  %v3228 = vadd.f32 0.0, %v3227
  %3229 = vdwg.mxu0
  %v3230 = vld [vmem:[%s3] sm:$0xff]
  %v3231 = vld [vmem:[%s3 + $0x8] sm:$0xff]
  %v3232 = vld [vmem:[%s3 + $0x10] sm:$0xff]
  %v3233 = vld [vmem:[%s3 + $0x18] sm:$0xff]
  %v3234 = vld [vmem:[%s3 + $0x20] sm:$0xff]
  %v3235 = vld [vmem:[%s3 + $0x28] sm:$0xff]
  %v3236 = vld [vmem:[%s3 + $0x30] sm:$0xff]
  %v3237 = vld [vmem:[%s3 + $0x38] sm:$0xff]
  %v3238 = vld [vmem:[%s3 + $0x40] sm:$0xff]
  %v3239 = vld [vmem:[%s3 + $0x48] sm:$0xff]
  %v3240 = vld [vmem:[%s3 + $0x50] sm:$0xff]
  %v3241 = vld [vmem:[%s3 + $0x58] sm:$0xff]
  %v3242 = vld [vmem:[%s3 + $0x60] sm:$0xff]
  %v3243 = vld [vmem:[%s3 + $0x68] sm:$0xff]
  %v3244 = vld [vmem:[%s3 + $0x70] sm:$0xff]
  %v3245 = vld [vmem:[%s3 + $0x78] sm:$0xff]
  %v3246 = vld [vmem:[%s3 + $0x80] sm:$0xff]
  %v3247 = vld [vmem:[%s3 + $0x88] sm:$0xff]
  %v3248 = vld [vmem:[%s3 + $0x90] sm:$0xff]
  %v3249 = vld [vmem:[%s3 + $0x98] sm:$0xff]
  %v3250 = vld [vmem:[%s3 + $0xa0] sm:$0xff]
  %v3251 = vld [vmem:[%s3 + $0xa8] sm:$0xff]
  %v3252 = vld [vmem:[%s3 + $0xb0] sm:$0xff]
  %v3253 = vld [vmem:[%s3 + $0xb8] sm:$0xff]
  %v3254 = vld [vmem:[%s3 + $0xc0] sm:$0xff]
  %v3255 = vld [vmem:[%s3 + $0xc8] sm:$0xff]
  %v3256 = vld [vmem:[%s3 + $0xd0] sm:$0xff]
  %v3257 = vld [vmem:[%s3 + $0xd8] sm:$0xff]
  %v3258 = vld [vmem:[%s3 + $0xe0] sm:$0xff]
  %v3259 = vld [vmem:[%s3 + $0xe8] sm:$0xff]
  %v3260 = vld [vmem:[%s3 + $0xf0] sm:$0xff]
  %v3261 = vld [vmem:[%s3 + $0xf8] sm:$0xff]
  %3263 = vset.pattern.permute.xlu0 0
  %3264 = vperm.xlu0 %3263, %v3230
  %v3265 = vpop.permute.xlu0 %3264
  %3268 = vset.pattern.permute.xlu0 0
  %3269 = vperm.xlu0 %3268, %v3231
  %v3270 = vpop.permute.xlu0 %3269
  %3273 = vset.pattern.permute.xlu0 0
  %3274 = vperm.xlu0 %3273, %v3232
  %v3275 = vpop.permute.xlu0 %3274
  %3278 = vset.pattern.permute.xlu0 0
  %3279 = vperm.xlu0 %3278, %v3233
  %v3280 = vpop.permute.xlu0 %3279
  %3283 = vset.pattern.permute.xlu0 0
  %3284 = vperm.xlu0 %3283, %v3234
  %v3285 = vpop.permute.xlu0 %3284
  %3288 = vset.pattern.permute.xlu0 0
  %3289 = vperm.xlu0 %3288, %v3235
  %v3290 = vpop.permute.xlu0 %3289
  %3293 = vset.pattern.permute.xlu0 0
  %3294 = vperm.xlu0 %3293, %v3236
  %v3295 = vpop.permute.xlu0 %3294
  %3298 = vset.pattern.permute.xlu0 0
  %3299 = vperm.xlu0 %3298, %v3237
  %v3300 = vpop.permute.xlu0 %3299
  %3303 = vset.pattern.permute.xlu0 0
  %3304 = vperm.xlu0 %3303, %v3238
  %v3305 = vpop.permute.xlu0 %3304
  %3308 = vset.pattern.permute.xlu0 0
  %3309 = vperm.xlu0 %3308, %v3239
  %v3310 = vpop.permute.xlu0 %3309
  %3313 = vset.pattern.permute.xlu0 0
  %3314 = vperm.xlu0 %3313, %v3240
  %v3315 = vpop.permute.xlu0 %3314
  %3318 = vset.pattern.permute.xlu0 0
  %3319 = vperm.xlu0 %3318, %v3241
  %v3320 = vpop.permute.xlu0 %3319
  %3323 = vset.pattern.permute.xlu0 0
  %3324 = vperm.xlu0 %3323, %v3242
  %v3325 = vpop.permute.xlu0 %3324
  %3328 = vset.pattern.permute.xlu0 0
  %3329 = vperm.xlu0 %3328, %v3243
  %v3330 = vpop.permute.xlu0 %3329
  %3333 = vset.pattern.permute.xlu0 0
  %3334 = vperm.xlu0 %3333, %v3244
  %v3335 = vpop.permute.xlu0 %3334
  %3338 = vset.pattern.permute.xlu0 0
  %3339 = vperm.xlu0 %3338, %v3245
  %v3340 = vpop.permute.xlu0 %3339
  %3343 = vset.pattern.permute.xlu0 0
  %3344 = vperm.xlu0 %3343, %v3246
  %v3345 = vpop.permute.xlu0 %3344
  %3348 = vset.pattern.permute.xlu0 0
  %3349 = vperm.xlu0 %3348, %v3247
  %v3350 = vpop.permute.xlu0 %3349
  %3353 = vset.pattern.permute.xlu0 0
  %3354 = vperm.xlu0 %3353, %v3248
  %v3355 = vpop.permute.xlu0 %3354
  %3358 = vset.pattern.permute.xlu0 0
  %3359 = vperm.xlu0 %3358, %v3249
  %v3360 = vpop.permute.xlu0 %3359
  %3363 = vset.pattern.permute.xlu0 0
  %3364 = vperm.xlu0 %3363, %v3250
  %v3365 = vpop.permute.xlu0 %3364
  %3368 = vset.pattern.permute.xlu0 0
  %3369 = vperm.xlu0 %3368, %v3251
  %v3370 = vpop.permute.xlu0 %3369
  %3373 = vset.pattern.permute.xlu0 0
  %3374 = vperm.xlu0 %3373, %v3252
  %v3375 = vpop.permute.xlu0 %3374
  %3378 = vset.pattern.permute.xlu0 0
  %3379 = vperm.xlu0 %3378, %v3253
  %v3380 = vpop.permute.xlu0 %3379
  %3383 = vset.pattern.permute.xlu0 0
  %3384 = vperm.xlu0 %3383, %v3254
  %v3385 = vpop.permute.xlu0 %3384
  %3388 = vset.pattern.permute.xlu0 0
  %3389 = vperm.xlu0 %3388, %v3255
  %v3390 = vpop.permute.xlu0 %3389
  %3393 = vset.pattern.permute.xlu0 0
  %3394 = vperm.xlu0 %3393, %v3256
  %v3395 = vpop.permute.xlu0 %3394
  %3398 = vset.pattern.permute.xlu0 0
  %3399 = vperm.xlu0 %3398, %v3257
  %v3400 = vpop.permute.xlu0 %3399
  %3403 = vset.pattern.permute.xlu0 0
  %3404 = vperm.xlu0 %3403, %v3258
  %v3405 = vpop.permute.xlu0 %3404
  %3408 = vset.pattern.permute.xlu0 0
  %3409 = vperm.xlu0 %3408, %v3259
  %v3410 = vpop.permute.xlu0 %3409
  %3413 = vset.pattern.permute.xlu0 0
  %3414 = vperm.xlu0 %3413, %v3260
  %v3415 = vpop.permute.xlu0 %3414
  %3418 = vset.pattern.permute.xlu0 0
  %3419 = vperm.xlu0 %3418, %v3261
  %v3420 = vpop.permute.xlu0 %3419
  %v3422 = vsub.f32 %v3265, %v1241
  %v3423 = vsub.f32 %v3265, %v1243
  %v3424 = vsub.f32 %v3265, %v1498
  %v3425 = vsub.f32 %v3265, %v1500
  %v3426 = vsub.f32 %v3265, %v1755
  %v3427 = vsub.f32 %v3265, %v1757
  %v3428 = vsub.f32 %v3265, %v2012
  %v3429 = vsub.f32 %v3265, %v2014
  %v3430 = vsub.f32 %v3265, %v2269
  %v3431 = vsub.f32 %v3265, %v2271
  %v3432 = vsub.f32 %v3265, %v2526
  %v3433 = vsub.f32 %v3265, %v2528
  %v3434 = vsub.f32 %v3265, %v2783
  %v3435 = vsub.f32 %v3265, %v2785
  %v3436 = vsub.f32 %v3265, %v3040
  %v3437 = vsub.f32 %v3265, %v3042
  %v3438 = vsub.f32 %v3270, %v1247
  %v3439 = vsub.f32 %v3270, %v1249
  %v3440 = vsub.f32 %v3270, %v1504
  %v3441 = vsub.f32 %v3270, %v1506
  %v3442 = vsub.f32 %v3270, %v1761
  %v3443 = vsub.f32 %v3270, %v1763
  %v3444 = vsub.f32 %v3270, %v2018
  %v3445 = vsub.f32 %v3270, %v2020
  %v3446 = vsub.f32 %v3270, %v2275
  %v3447 = vsub.f32 %v3270, %v2277
  %v3448 = vsub.f32 %v3270, %v2532
  %v3449 = vsub.f32 %v3270, %v2534
  %v3450 = vsub.f32 %v3270, %v2789
  %v3451 = vsub.f32 %v3270, %v2791
  %v3452 = vsub.f32 %v3270, %v3046
  %v3453 = vsub.f32 %v3270, %v3048
  %v3454 = vsub.f32 %v3275, %v1253
  %v3455 = vsub.f32 %v3275, %v1255
  %v3456 = vsub.f32 %v3275, %v1510
  %v3457 = vsub.f32 %v3275, %v1512
  %v3458 = vsub.f32 %v3275, %v1767
  %v3459 = vsub.f32 %v3275, %v1769
  %v3460 = vsub.f32 %v3275, %v2024
  %v3461 = vsub.f32 %v3275, %v2026
  %v3462 = vsub.f32 %v3275, %v2281
  %v3463 = vsub.f32 %v3275, %v2283
  %v3464 = vsub.f32 %v3275, %v2538
  %v3465 = vsub.f32 %v3275, %v2540
  %v3466 = vsub.f32 %v3275, %v2795
  %v3467 = vsub.f32 %v3275, %v2797
  %v3468 = vsub.f32 %v3275, %v3052
  %v3469 = vsub.f32 %v3275, %v3054
  %v3470 = vsub.f32 %v3280, %v1259
  %v3471 = vsub.f32 %v3280, %v1261
  %v3472 = vsub.f32 %v3280, %v1516
  %v3473 = vsub.f32 %v3280, %v1518
  %v3474 = vsub.f32 %v3280, %v1773
  %v3475 = vsub.f32 %v3280, %v1775
  %v3476 = vsub.f32 %v3280, %v2030
  %v3477 = vsub.f32 %v3280, %v2032
  %v3478 = vsub.f32 %v3280, %v2287
  %v3479 = vsub.f32 %v3280, %v2289
  %v3480 = vsub.f32 %v3280, %v2544
  %v3481 = vsub.f32 %v3280, %v2546
  %v3482 = vsub.f32 %v3280, %v2801
  %v3483 = vsub.f32 %v3280, %v2803
  %v3484 = vsub.f32 %v3280, %v3058
  %v3485 = vsub.f32 %v3280, %v3060
  %v3486 = vsub.f32 %v3285, %v1265
  %v3487 = vsub.f32 %v3285, %v1267
  %v3488 = vsub.f32 %v3285, %v1522
  %v3489 = vsub.f32 %v3285, %v1524
  %v3490 = vsub.f32 %v3285, %v1779
  %v3491 = vsub.f32 %v3285, %v1781
  %v3492 = vsub.f32 %v3285, %v2036
  %v3493 = vsub.f32 %v3285, %v2038
  %v3494 = vsub.f32 %v3285, %v2293
  %v3495 = vsub.f32 %v3285, %v2295
  %v3496 = vsub.f32 %v3285, %v2550
  %v3497 = vsub.f32 %v3285, %v2552
  %v3498 = vsub.f32 %v3285, %v2807
  %v3499 = vsub.f32 %v3285, %v2809
  %v3500 = vsub.f32 %v3285, %v3064
  %v3501 = vsub.f32 %v3285, %v3066
  %v3502 = vsub.f32 %v3290, %v1271
  %v3503 = vsub.f32 %v3290, %v1273
  %v3504 = vsub.f32 %v3290, %v1528
  %v3505 = vsub.f32 %v3290, %v1530
  %v3506 = vsub.f32 %v3290, %v1785
  %v3507 = vsub.f32 %v3290, %v1787
  %v3508 = vsub.f32 %v3290, %v2042
  %v3509 = vsub.f32 %v3290, %v2044
  %v3510 = vsub.f32 %v3290, %v2299
  %v3511 = vsub.f32 %v3290, %v2301
  %v3512 = vsub.f32 %v3290, %v2556
  %v3513 = vsub.f32 %v3290, %v2558
  %v3514 = vsub.f32 %v3290, %v2813
  %v3515 = vsub.f32 %v3290, %v2815
  %v3516 = vsub.f32 %v3290, %v3070
  %v3517 = vsub.f32 %v3290, %v3072
  %v3518 = vsub.f32 %v3295, %v1277
  %v3519 = vsub.f32 %v3295, %v1279
  %v3520 = vsub.f32 %v3295, %v1534
  %v3521 = vsub.f32 %v3295, %v1536
  %v3522 = vsub.f32 %v3295, %v1791
  %v3523 = vsub.f32 %v3295, %v1793
  %v3524 = vsub.f32 %v3295, %v2048
  %v3525 = vsub.f32 %v3295, %v2050
  %v3526 = vsub.f32 %v3295, %v2305
  %v3527 = vsub.f32 %v3295, %v2307
  %v3528 = vsub.f32 %v3295, %v2562
  %v3529 = vsub.f32 %v3295, %v2564
  %v3530 = vsub.f32 %v3295, %v2819
  %v3531 = vsub.f32 %v3295, %v2821
  %v3532 = vsub.f32 %v3295, %v3076
  %v3533 = vsub.f32 %v3295, %v3078
  %v3534 = vsub.f32 %v3300, %v1283
  %v3535 = vsub.f32 %v3300, %v1285
  %v3536 = vsub.f32 %v3300, %v1540
  %v3537 = vsub.f32 %v3300, %v1542
  %v3538 = vsub.f32 %v3300, %v1797
  %v3539 = vsub.f32 %v3300, %v1799
  %v3540 = vsub.f32 %v3300, %v2054
  %v3541 = vsub.f32 %v3300, %v2056
  %v3542 = vsub.f32 %v3300, %v2311
  %v3543 = vsub.f32 %v3300, %v2313
  %v3544 = vsub.f32 %v3300, %v2568
  %v3545 = vsub.f32 %v3300, %v2570
  %v3546 = vsub.f32 %v3300, %v2825
  %v3547 = vsub.f32 %v3300, %v2827
  %v3548 = vsub.f32 %v3300, %v3082
  %v3549 = vsub.f32 %v3300, %v3084
  %v3550 = vsub.f32 %v3305, %v1289
  %v3551 = vsub.f32 %v3305, %v1291
  %v3552 = vsub.f32 %v3305, %v1546
  %v3553 = vsub.f32 %v3305, %v1548
  %v3554 = vsub.f32 %v3305, %v1803
  %v3555 = vsub.f32 %v3305, %v1805
  %v3556 = vsub.f32 %v3305, %v2060
  %v3557 = vsub.f32 %v3305, %v2062
  %v3558 = vsub.f32 %v3305, %v2317
  %v3559 = vsub.f32 %v3305, %v2319
  %v3560 = vsub.f32 %v3305, %v2574
  %v3561 = vsub.f32 %v3305, %v2576
  %v3562 = vsub.f32 %v3305, %v2831
  %v3563 = vsub.f32 %v3305, %v2833
  %v3564 = vsub.f32 %v3305, %v3088
  %v3565 = vsub.f32 %v3305, %v3090
  %v3566 = vsub.f32 %v3310, %v1295
  %v3567 = vsub.f32 %v3310, %v1297
  %v3568 = vsub.f32 %v3310, %v1552
  %v3569 = vsub.f32 %v3310, %v1554
  %v3570 = vsub.f32 %v3310, %v1809
  %v3571 = vsub.f32 %v3310, %v1811
  %v3572 = vsub.f32 %v3310, %v2066
  %v3573 = vsub.f32 %v3310, %v2068
  %v3574 = vsub.f32 %v3310, %v2323
  %v3575 = vsub.f32 %v3310, %v2325
  %v3576 = vsub.f32 %v3310, %v2580
  %v3577 = vsub.f32 %v3310, %v2582
  %v3578 = vsub.f32 %v3310, %v2837
  %v3579 = vsub.f32 %v3310, %v2839
  %v3580 = vsub.f32 %v3310, %v3094
  %v3581 = vsub.f32 %v3310, %v3096
  %v3582 = vsub.f32 %v3315, %v1301
  %v3583 = vsub.f32 %v3315, %v1303
  %v3584 = vsub.f32 %v3315, %v1558
  %v3585 = vsub.f32 %v3315, %v1560
  %v3586 = vsub.f32 %v3315, %v1815
  %v3587 = vsub.f32 %v3315, %v1817
  %v3588 = vsub.f32 %v3315, %v2072
  %v3589 = vsub.f32 %v3315, %v2074
  %v3590 = vsub.f32 %v3315, %v2329
  %v3591 = vsub.f32 %v3315, %v2331
  %v3592 = vsub.f32 %v3315, %v2586
  %v3593 = vsub.f32 %v3315, %v2588
  %v3594 = vsub.f32 %v3315, %v2843
  %v3595 = vsub.f32 %v3315, %v2845
  %v3596 = vsub.f32 %v3315, %v3100
  %v3597 = vsub.f32 %v3315, %v3102
  %v3598 = vsub.f32 %v3320, %v1307
  %v3599 = vsub.f32 %v3320, %v1309
  %v3600 = vsub.f32 %v3320, %v1564
  %v3601 = vsub.f32 %v3320, %v1566
  %v3602 = vsub.f32 %v3320, %v1821
  %v3603 = vsub.f32 %v3320, %v1823
  %v3604 = vsub.f32 %v3320, %v2078
  %v3605 = vsub.f32 %v3320, %v2080
  %v3606 = vsub.f32 %v3320, %v2335
  %v3607 = vsub.f32 %v3320, %v2337
  %v3608 = vsub.f32 %v3320, %v2592
  %v3609 = vsub.f32 %v3320, %v2594
  %v3610 = vsub.f32 %v3320, %v2849
  %v3611 = vsub.f32 %v3320, %v2851
  %v3612 = vsub.f32 %v3320, %v3106
  %v3613 = vsub.f32 %v3320, %v3108
  %v3614 = vsub.f32 %v3325, %v1313
  %v3615 = vsub.f32 %v3325, %v1315
  %v3616 = vsub.f32 %v3325, %v1570
  %v3617 = vsub.f32 %v3325, %v1572
  %v3618 = vsub.f32 %v3325, %v1827
  %v3619 = vsub.f32 %v3325, %v1829
  %v3620 = vsub.f32 %v3325, %v2084
  %v3621 = vsub.f32 %v3325, %v2086
  %v3622 = vsub.f32 %v3325, %v2341
  %v3623 = vsub.f32 %v3325, %v2343
  %v3624 = vsub.f32 %v3325, %v2598
  %v3625 = vsub.f32 %v3325, %v2600
  %v3626 = vsub.f32 %v3325, %v2855
  %v3627 = vsub.f32 %v3325, %v2857
  %v3628 = vsub.f32 %v3325, %v3112
  %v3629 = vsub.f32 %v3325, %v3114
  %v3630 = vsub.f32 %v3330, %v1319
  %v3631 = vsub.f32 %v3330, %v1321
  %v3632 = vsub.f32 %v3330, %v1576
  %v3633 = vsub.f32 %v3330, %v1578
  %v3634 = vsub.f32 %v3330, %v1833
  %v3635 = vsub.f32 %v3330, %v1835
  %v3636 = vsub.f32 %v3330, %v2090
  %v3637 = vsub.f32 %v3330, %v2092
  %v3638 = vsub.f32 %v3330, %v2347
  %v3639 = vsub.f32 %v3330, %v2349
  %v3640 = vsub.f32 %v3330, %v2604
  %v3641 = vsub.f32 %v3330, %v2606
  %v3642 = vsub.f32 %v3330, %v2861
  %v3643 = vsub.f32 %v3330, %v2863
  %v3644 = vsub.f32 %v3330, %v3118
  %v3645 = vsub.f32 %v3330, %v3120
  %v3646 = vsub.f32 %v3335, %v1325
  %v3647 = vsub.f32 %v3335, %v1327
  %v3648 = vsub.f32 %v3335, %v1582
  %v3649 = vsub.f32 %v3335, %v1584
  %v3650 = vsub.f32 %v3335, %v1839
  %v3651 = vsub.f32 %v3335, %v1841
  %v3652 = vsub.f32 %v3335, %v2096
  %v3653 = vsub.f32 %v3335, %v2098
  %v3654 = vsub.f32 %v3335, %v2353
  %v3655 = vsub.f32 %v3335, %v2355
  %v3656 = vsub.f32 %v3335, %v2610
  %v3657 = vsub.f32 %v3335, %v2612
  %v3658 = vsub.f32 %v3335, %v2867
  %v3659 = vsub.f32 %v3335, %v2869
  %v3660 = vsub.f32 %v3335, %v3124
  %v3661 = vsub.f32 %v3335, %v3126
  %v3662 = vsub.f32 %v3340, %v1331
  %v3663 = vsub.f32 %v3340, %v1333
  %v3664 = vsub.f32 %v3340, %v1588
  %v3665 = vsub.f32 %v3340, %v1590
  %v3666 = vsub.f32 %v3340, %v1845
  %v3667 = vsub.f32 %v3340, %v1847
  %v3668 = vsub.f32 %v3340, %v2102
  %v3669 = vsub.f32 %v3340, %v2104
  %v3670 = vsub.f32 %v3340, %v2359
  %v3671 = vsub.f32 %v3340, %v2361
  %v3672 = vsub.f32 %v3340, %v2616
  %v3673 = vsub.f32 %v3340, %v2618
  %v3674 = vsub.f32 %v3340, %v2873
  %v3675 = vsub.f32 %v3340, %v2875
  %v3676 = vsub.f32 %v3340, %v3130
  %v3677 = vsub.f32 %v3340, %v3132
  %v3678 = vsub.f32 %v3345, %v1337
  %v3679 = vsub.f32 %v3345, %v1339
  %v3680 = vsub.f32 %v3345, %v1594
  %v3681 = vsub.f32 %v3345, %v1596
  %v3682 = vsub.f32 %v3345, %v1851
  %v3683 = vsub.f32 %v3345, %v1853
  %v3684 = vsub.f32 %v3345, %v2108
  %v3685 = vsub.f32 %v3345, %v2110
  %v3686 = vsub.f32 %v3345, %v2365
  %v3687 = vsub.f32 %v3345, %v2367
  %v3688 = vsub.f32 %v3345, %v2622
  %v3689 = vsub.f32 %v3345, %v2624
  %v3690 = vsub.f32 %v3345, %v2879
  %v3691 = vsub.f32 %v3345, %v2881
  %v3692 = vsub.f32 %v3345, %v3136
  %v3693 = vsub.f32 %v3345, %v3138
  %v3694 = vsub.f32 %v3350, %v1343
  %v3695 = vsub.f32 %v3350, %v1345
  %v3696 = vsub.f32 %v3350, %v1600
  %v3697 = vsub.f32 %v3350, %v1602
  %v3698 = vsub.f32 %v3350, %v1857
  %v3699 = vsub.f32 %v3350, %v1859
  %v3700 = vsub.f32 %v3350, %v2114
  %v3701 = vsub.f32 %v3350, %v2116
  %v3702 = vsub.f32 %v3350, %v2371
  %v3703 = vsub.f32 %v3350, %v2373
  %v3704 = vsub.f32 %v3350, %v2628
  %v3705 = vsub.f32 %v3350, %v2630
  %v3706 = vsub.f32 %v3350, %v2885
  %v3707 = vsub.f32 %v3350, %v2887
  %v3708 = vsub.f32 %v3350, %v3142
  %v3709 = vsub.f32 %v3350, %v3144
  %v3710 = vsub.f32 %v3355, %v1349
  %v3711 = vsub.f32 %v3355, %v1351
  %v3712 = vsub.f32 %v3355, %v1606
  %v3713 = vsub.f32 %v3355, %v1608
  %v3714 = vsub.f32 %v3355, %v1863
  %v3715 = vsub.f32 %v3355, %v1865
  %v3716 = vsub.f32 %v3355, %v2120
  %v3717 = vsub.f32 %v3355, %v2122
  %v3718 = vsub.f32 %v3355, %v2377
  %v3719 = vsub.f32 %v3355, %v2379
  %v3720 = vsub.f32 %v3355, %v2634
  %v3721 = vsub.f32 %v3355, %v2636
  %v3722 = vsub.f32 %v3355, %v2891
  %v3723 = vsub.f32 %v3355, %v2893
  %v3724 = vsub.f32 %v3355, %v3148
  %v3725 = vsub.f32 %v3355, %v3150
  %v3726 = vsub.f32 %v3360, %v1355
  %v3727 = vsub.f32 %v3360, %v1357
  %v3728 = vsub.f32 %v3360, %v1612
  %v3729 = vsub.f32 %v3360, %v1614
  %v3730 = vsub.f32 %v3360, %v1869
  %v3731 = vsub.f32 %v3360, %v1871
  %v3732 = vsub.f32 %v3360, %v2126
  %v3733 = vsub.f32 %v3360, %v2128
  %v3734 = vsub.f32 %v3360, %v2383
  %v3735 = vsub.f32 %v3360, %v2385
  %v3736 = vsub.f32 %v3360, %v2640
  %v3737 = vsub.f32 %v3360, %v2642
  %v3738 = vsub.f32 %v3360, %v2897
  %v3739 = vsub.f32 %v3360, %v2899
  %v3740 = vsub.f32 %v3360, %v3154
  %v3741 = vsub.f32 %v3360, %v3156
  %v3742 = vsub.f32 %v3365, %v1361
  %v3743 = vsub.f32 %v3365, %v1363
  %v3744 = vsub.f32 %v3365, %v1618
  %v3745 = vsub.f32 %v3365, %v1620
  %v3746 = vsub.f32 %v3365, %v1875
  %v3747 = vsub.f32 %v3365, %v1877
  %v3748 = vsub.f32 %v3365, %v2132
  %v3749 = vsub.f32 %v3365, %v2134
  %v3750 = vsub.f32 %v3365, %v2389
  %v3751 = vsub.f32 %v3365, %v2391
  %v3752 = vsub.f32 %v3365, %v2646
  %v3753 = vsub.f32 %v3365, %v2648
  %v3754 = vsub.f32 %v3365, %v2903
  %v3755 = vsub.f32 %v3365, %v2905
  %v3756 = vsub.f32 %v3365, %v3160
  %v3757 = vsub.f32 %v3365, %v3162
  %v3758 = vsub.f32 %v3370, %v1367
  %v3759 = vsub.f32 %v3370, %v1369
  %v3760 = vsub.f32 %v3370, %v1624
  %v3761 = vsub.f32 %v3370, %v1626
  %v3762 = vsub.f32 %v3370, %v1881
  %v3763 = vsub.f32 %v3370, %v1883
  %v3764 = vsub.f32 %v3370, %v2138
  %v3765 = vsub.f32 %v3370, %v2140
  %v3766 = vsub.f32 %v3370, %v2395
  %v3767 = vsub.f32 %v3370, %v2397
  %v3768 = vsub.f32 %v3370, %v2652
  %v3769 = vsub.f32 %v3370, %v2654
  %v3770 = vsub.f32 %v3370, %v2909
  %v3771 = vsub.f32 %v3370, %v2911
  %v3772 = vsub.f32 %v3370, %v3166
  %v3773 = vsub.f32 %v3370, %v3168
  %v3774 = vsub.f32 %v3375, %v1373
  %v3775 = vsub.f32 %v3375, %v1375
  %v3776 = vsub.f32 %v3375, %v1630
  %v3777 = vsub.f32 %v3375, %v1632
  %v3778 = vsub.f32 %v3375, %v1887
  %v3779 = vsub.f32 %v3375, %v1889
  %v3780 = vsub.f32 %v3375, %v2144
  %v3781 = vsub.f32 %v3375, %v2146
  %v3782 = vsub.f32 %v3375, %v2401
  %v3783 = vsub.f32 %v3375, %v2403
  %v3784 = vsub.f32 %v3375, %v2658
  %v3785 = vsub.f32 %v3375, %v2660
  %v3786 = vsub.f32 %v3375, %v2915
  %v3787 = vsub.f32 %v3375, %v2917
  %v3788 = vsub.f32 %v3375, %v3172
  %v3789 = vsub.f32 %v3375, %v3174
  %v3790 = vsub.f32 %v3380, %v1379
  %v3791 = vsub.f32 %v3380, %v1381
  %v3792 = vsub.f32 %v3380, %v1636
  %v3793 = vsub.f32 %v3380, %v1638
  %v3794 = vsub.f32 %v3380, %v1893
  %v3795 = vsub.f32 %v3380, %v1895
  %v3796 = vsub.f32 %v3380, %v2150
  %v3797 = vsub.f32 %v3380, %v2152
  %v3798 = vsub.f32 %v3380, %v2407
  %v3799 = vsub.f32 %v3380, %v2409
  %v3800 = vsub.f32 %v3380, %v2664
  %v3801 = vsub.f32 %v3380, %v2666
  %v3802 = vsub.f32 %v3380, %v2921
  %v3803 = vsub.f32 %v3380, %v2923
  %v3804 = vsub.f32 %v3380, %v3178
  %v3805 = vsub.f32 %v3380, %v3180
  %v3806 = vsub.f32 %v3385, %v1385
  %v3807 = vsub.f32 %v3385, %v1387
  %v3808 = vsub.f32 %v3385, %v1642
  %v3809 = vsub.f32 %v3385, %v1644
  %v3810 = vsub.f32 %v3385, %v1899
  %v3811 = vsub.f32 %v3385, %v1901
  %v3812 = vsub.f32 %v3385, %v2156
  %v3813 = vsub.f32 %v3385, %v2158
  %v3814 = vsub.f32 %v3385, %v2413
  %v3815 = vsub.f32 %v3385, %v2415
  %v3816 = vsub.f32 %v3385, %v2670
  %v3817 = vsub.f32 %v3385, %v2672
  %v3818 = vsub.f32 %v3385, %v2927
  %v3819 = vsub.f32 %v3385, %v2929
  %v3820 = vsub.f32 %v3385, %v3184
  %v3821 = vsub.f32 %v3385, %v3186
  %v3822 = vsub.f32 %v3390, %v1391
  %v3823 = vsub.f32 %v3390, %v1393
  %v3824 = vsub.f32 %v3390, %v1648
  %v3825 = vsub.f32 %v3390, %v1650
  %v3826 = vsub.f32 %v3390, %v1905
  %v3827 = vsub.f32 %v3390, %v1907
  %v3828 = vsub.f32 %v3390, %v2162
  %v3829 = vsub.f32 %v3390, %v2164
  %v3830 = vsub.f32 %v3390, %v2419
  %v3831 = vsub.f32 %v3390, %v2421
  %v3832 = vsub.f32 %v3390, %v2676
  %v3833 = vsub.f32 %v3390, %v2678
  %v3834 = vsub.f32 %v3390, %v2933
  %v3835 = vsub.f32 %v3390, %v2935
  %v3836 = vsub.f32 %v3390, %v3190
  %v3837 = vsub.f32 %v3390, %v3192
  %v3838 = vsub.f32 %v3395, %v1397
  %v3839 = vsub.f32 %v3395, %v1399
  %v3840 = vsub.f32 %v3395, %v1654
  %v3841 = vsub.f32 %v3395, %v1656
  %v3842 = vsub.f32 %v3395, %v1911
  %v3843 = vsub.f32 %v3395, %v1913
  %v3844 = vsub.f32 %v3395, %v2168
  %v3845 = vsub.f32 %v3395, %v2170
  %v3846 = vsub.f32 %v3395, %v2425
  %v3847 = vsub.f32 %v3395, %v2427
  %v3848 = vsub.f32 %v3395, %v2682
  %v3849 = vsub.f32 %v3395, %v2684
  %v3850 = vsub.f32 %v3395, %v2939
  %v3851 = vsub.f32 %v3395, %v2941
  %v3852 = vsub.f32 %v3395, %v3196
  %v3853 = vsub.f32 %v3395, %v3198
  %v3854 = vsub.f32 %v3400, %v1403
  %v3855 = vsub.f32 %v3400, %v1405
  %v3856 = vsub.f32 %v3400, %v1660
  %v3857 = vsub.f32 %v3400, %v1662
  %v3858 = vsub.f32 %v3400, %v1917
  %v3859 = vsub.f32 %v3400, %v1919
  %v3860 = vsub.f32 %v3400, %v2174
  %v3861 = vsub.f32 %v3400, %v2176
  %v3862 = vsub.f32 %v3400, %v2431
  %v3863 = vsub.f32 %v3400, %v2433
  %v3864 = vsub.f32 %v3400, %v2688
  %v3865 = vsub.f32 %v3400, %v2690
  %v3866 = vsub.f32 %v3400, %v2945
  %v3867 = vsub.f32 %v3400, %v2947
  %v3868 = vsub.f32 %v3400, %v3202
  %v3869 = vsub.f32 %v3400, %v3204
  %v3870 = vsub.f32 %v3405, %v1409
  %v3871 = vsub.f32 %v3405, %v1411
  %v3872 = vsub.f32 %v3405, %v1666
  %v3873 = vsub.f32 %v3405, %v1668
  %v3874 = vsub.f32 %v3405, %v1923
  %v3875 = vsub.f32 %v3405, %v1925
  %v3876 = vsub.f32 %v3405, %v2180
  %v3877 = vsub.f32 %v3405, %v2182
  %v3878 = vsub.f32 %v3405, %v2437
  %v3879 = vsub.f32 %v3405, %v2439
  %v3880 = vsub.f32 %v3405, %v2694
  %v3881 = vsub.f32 %v3405, %v2696
  %v3882 = vsub.f32 %v3405, %v2951
  %v3883 = vsub.f32 %v3405, %v2953
  %v3884 = vsub.f32 %v3405, %v3208
  %v3885 = vsub.f32 %v3405, %v3210
  %v3886 = vsub.f32 %v3410, %v1415
  %v3887 = vsub.f32 %v3410, %v1417
  %v3888 = vsub.f32 %v3410, %v1672
  %v3889 = vsub.f32 %v3410, %v1674
  %v3890 = vsub.f32 %v3410, %v1929
  %v3891 = vsub.f32 %v3410, %v1931
  %v3892 = vsub.f32 %v3410, %v2186
  %v3893 = vsub.f32 %v3410, %v2188
  %v3894 = vsub.f32 %v3410, %v2443
  %v3895 = vsub.f32 %v3410, %v2445
  %v3896 = vsub.f32 %v3410, %v2700
  %v3897 = vsub.f32 %v3410, %v2702
  %v3898 = vsub.f32 %v3410, %v2957
  %v3899 = vsub.f32 %v3410, %v2959
  %v3900 = vsub.f32 %v3410, %v3214
  %v3901 = vsub.f32 %v3410, %v3216
  %v3902 = vsub.f32 %v3415, %v1421
  %v3903 = vsub.f32 %v3415, %v1423
  %v3904 = vsub.f32 %v3415, %v1678
  %v3905 = vsub.f32 %v3415, %v1680
  %v3906 = vsub.f32 %v3415, %v1935
  %v3907 = vsub.f32 %v3415, %v1937
  %v3908 = vsub.f32 %v3415, %v2192
  %v3909 = vsub.f32 %v3415, %v2194
  %v3910 = vsub.f32 %v3415, %v2449
  %v3911 = vsub.f32 %v3415, %v2451
  %v3912 = vsub.f32 %v3415, %v2706
  %v3913 = vsub.f32 %v3415, %v2708
  %v3914 = vsub.f32 %v3415, %v2963
  %v3915 = vsub.f32 %v3415, %v2965
  %v3916 = vsub.f32 %v3415, %v3220
  %v3917 = vsub.f32 %v3415, %v3222
  %v3918 = vsub.f32 %v3420, %v1427
  %v3919 = vsub.f32 %v3420, %v1429
  %v3920 = vsub.f32 %v3420, %v1684
  %v3921 = vsub.f32 %v3420, %v1686
  %v3922 = vsub.f32 %v3420, %v1941
  %v3923 = vsub.f32 %v3420, %v1943
  %v3924 = vsub.f32 %v3420, %v2198
  %v3925 = vsub.f32 %v3420, %v2200
  %v3926 = vsub.f32 %v3420, %v2455
  %v3927 = vsub.f32 %v3420, %v2457
  %v3928 = vsub.f32 %v3420, %v2712
  %v3929 = vsub.f32 %v3420, %v2714
  %v3930 = vsub.f32 %v3420, %v2969
  %v3931 = vsub.f32 %v3420, %v2971
  %v3932 = vsub.f32 %v3420, %v3226
  %v3933 = vsub.f32 %v3420, %v3228
  %v3934 = vlaneseq
  %v3935 = vshrl.u32 %v3934, 7
  %v3936 = vadd.s32 %v3935, 8
  %v3937 = vadd.s32 %v3935, 16
  %v3938 = vadd.s32 %v3935, 24
  %v3939 = vadd.s32 %v3935, 32
  %v3940 = vadd.s32 %v3935, 40
  %v3941 = vadd.s32 %v3935, 48
  %v3942 = vadd.s32 %v3935, 56
  %v3943 = vadd.s32 %v3935, 64
  %v3944 = vadd.s32 %v3935, 72
  %v3945 = vadd.s32 %v3935, 80
  %v3946 = vadd.s32 %v3935, 88
  %v3947 = vadd.s32 %v3935, 96
  %v3948 = vadd.s32 %v3935, 104
  %v3949 = vadd.s32 %v3935, 112
  %v3950 = vadd.s32 %v3935, 120
  %v3951 = vadd.s32 %v3935, 128
  %v3952 = vadd.s32 %v3935, 136
  %v3953 = vadd.s32 %v3935, 144
  %v3954 = vadd.s32 %v3935, 152
  %v3955 = vadd.s32 %v3935, 160
  %v3956 = vadd.s32 %v3935, 168
  %v3957 = vadd.s32 %v3935, 176
  %v3958 = vadd.s32 %v3935, 184
  %v3959 = vadd.s32 %v3935, 192
  %v3960 = vadd.s32 %v3935, 200
  %v3961 = vadd.s32 %v3935, 208
  %v3962 = vadd.s32 %v3935, 216
  %v3963 = vadd.s32 %v3935, 224
  %v3964 = vadd.s32 %v3935, 232
  %v3965 = vadd.s32 %v3935, 240
  %v3966 = vadd.s32 %v3935, 248
  %v3967 = vmin.f32 %v3422, %v3438
  %v3968 = vmin.f32 %v3967, %v3454
  %v3969 = vmin.f32 %v3968, %v3470
  %v3970 = vmin.f32 %v3969, %v3486
  %v3971 = vmin.f32 %v3970, %v3502
  %v3972 = vmin.f32 %v3971, %v3518
  %v3973 = vmin.f32 %v3972, %v3534
  %v3974 = vmin.f32 %v3973, %v3550
  %v3975 = vmin.f32 %v3974, %v3566
  %v3976 = vmin.f32 %v3975, %v3582
  %v3977 = vmin.f32 %v3976, %v3598
  %v3978 = vmin.f32 %v3977, %v3614
  %v3979 = vmin.f32 %v3978, %v3630
  %v3980 = vmin.f32 %v3979, %v3646
  %v3981 = vmin.f32 %v3980, %v3662
  %v3982 = vmin.f32 %v3981, %v3678
  %v3983 = vmin.f32 %v3982, %v3694
  %v3984 = vmin.f32 %v3983, %v3710
  %v3985 = vmin.f32 %v3984, %v3726
  %v3986 = vmin.f32 %v3985, %v3742
  %v3987 = vmin.f32 %v3986, %v3758
  %v3988 = vmin.f32 %v3987, %v3774
  %v3989 = vmin.f32 %v3988, %v3790
  %v3990 = vmin.f32 %v3989, %v3806
  %v3991 = vmin.f32 %v3990, %v3822
  %v3992 = vmin.f32 %v3991, %v3838
  %v3993 = vmin.f32 %v3992, %v3854
  %v3994 = vmin.f32 %v3993, %v3870
  %v3995 = vmin.f32 %v3994, %v3886
  %v3996 = vmin.f32 %v3995, %v3902
  %v3997 = vmin.f32 %v3996, %v3918
  %v3998 = vrot.slane %v3997, 4
  %v3999 = vmin.f32 %v3997, %v3998
  %v4000 = vrot.slane %v3999, 2
  %v4001 = vmin.f32 %v3999, %v4000
  %v4002 = vrot.slane %v4001, 1
  %v4003 = vmin.f32 %v4001, %v4002
  %v4004 = vmin.f32 %v3423, %v3439
  %v4005 = vmin.f32 %v4004, %v3455
  %v4006 = vmin.f32 %v4005, %v3471
  %v4007 = vmin.f32 %v4006, %v3487
  %v4008 = vmin.f32 %v4007, %v3503
  %v4009 = vmin.f32 %v4008, %v3519
  %v4010 = vmin.f32 %v4009, %v3535
  %v4011 = vmin.f32 %v4010, %v3551
  %v4012 = vmin.f32 %v4011, %v3567
  %v4013 = vmin.f32 %v4012, %v3583
  %v4014 = vmin.f32 %v4013, %v3599
  %v4015 = vmin.f32 %v4014, %v3615
  %v4016 = vmin.f32 %v4015, %v3631
  %v4017 = vmin.f32 %v4016, %v3647
  %v4018 = vmin.f32 %v4017, %v3663
  %v4019 = vmin.f32 %v4018, %v3679
  %v4020 = vmin.f32 %v4019, %v3695
  %v4021 = vmin.f32 %v4020, %v3711
  %v4022 = vmin.f32 %v4021, %v3727
  %v4023 = vmin.f32 %v4022, %v3743
  %v4024 = vmin.f32 %v4023, %v3759
  %v4025 = vmin.f32 %v4024, %v3775
  %v4026 = vmin.f32 %v4025, %v3791
  %v4027 = vmin.f32 %v4026, %v3807
  %v4028 = vmin.f32 %v4027, %v3823
  %v4029 = vmin.f32 %v4028, %v3839
  %v4030 = vmin.f32 %v4029, %v3855
  %v4031 = vmin.f32 %v4030, %v3871
  %v4032 = vmin.f32 %v4031, %v3887
  %v4033 = vmin.f32 %v4032, %v3903
  %v4034 = vmin.f32 %v4033, %v3919
  %v4035 = vrot.slane %v4034, 4
  %v4036 = vmin.f32 %v4034, %v4035
  %v4037 = vrot.slane %v4036, 2
  %v4038 = vmin.f32 %v4036, %v4037
  %v4039 = vrot.slane %v4038, 1
  %v4040 = vmin.f32 %v4038, %v4039
  %v4041 = vmin.f32 %v3424, %v3440
  %v4042 = vmin.f32 %v4041, %v3456
  %v4043 = vmin.f32 %v4042, %v3472
  %v4044 = vmin.f32 %v4043, %v3488
  %v4045 = vmin.f32 %v4044, %v3504
  %v4046 = vmin.f32 %v4045, %v3520
  %v4047 = vmin.f32 %v4046, %v3536
  %v4048 = vmin.f32 %v4047, %v3552
  %v4049 = vmin.f32 %v4048, %v3568
  %v4050 = vmin.f32 %v4049, %v3584
  %v4051 = vmin.f32 %v4050, %v3600
  %v4052 = vmin.f32 %v4051, %v3616
  %v4053 = vmin.f32 %v4052, %v3632
  %v4054 = vmin.f32 %v4053, %v3648
  %v4055 = vmin.f32 %v4054, %v3664
  %v4056 = vmin.f32 %v4055, %v3680
  %v4057 = vmin.f32 %v4056, %v3696
  %v4058 = vmin.f32 %v4057, %v3712
  %v4059 = vmin.f32 %v4058, %v3728
  %v4060 = vmin.f32 %v4059, %v3744
  %v4061 = vmin.f32 %v4060, %v3760
  %v4062 = vmin.f32 %v4061, %v3776
  %v4063 = vmin.f32 %v4062, %v3792
  %v4064 = vmin.f32 %v4063, %v3808
  %v4065 = vmin.f32 %v4064, %v3824
  %v4066 = vmin.f32 %v4065, %v3840
  %v4067 = vmin.f32 %v4066, %v3856
  %v4068 = vmin.f32 %v4067, %v3872
  %v4069 = vmin.f32 %v4068, %v3888
  %v4070 = vmin.f32 %v4069, %v3904
  %v4071 = vmin.f32 %v4070, %v3920
  %v4072 = vrot.slane %v4071, 4
  %v4073 = vmin.f32 %v4071, %v4072
  %v4074 = vrot.slane %v4073, 2
  %v4075 = vmin.f32 %v4073, %v4074
  %v4076 = vrot.slane %v4075, 1
  %v4077 = vmin.f32 %v4075, %v4076
  %v4078 = vmin.f32 %v3425, %v3441
  %v4079 = vmin.f32 %v4078, %v3457
  %v4080 = vmin.f32 %v4079, %v3473
  %v4081 = vmin.f32 %v4080, %v3489
  %v4082 = vmin.f32 %v4081, %v3505
  %v4083 = vmin.f32 %v4082, %v3521
  %v4084 = vmin.f32 %v4083, %v3537
  %v4085 = vmin.f32 %v4084, %v3553
  %v4086 = vmin.f32 %v4085, %v3569
  %v4087 = vmin.f32 %v4086, %v3585
  %v4088 = vmin.f32 %v4087, %v3601
  %v4089 = vmin.f32 %v4088, %v3617
  %v4090 = vmin.f32 %v4089, %v3633
  %v4091 = vmin.f32 %v4090, %v3649
  %v4092 = vmin.f32 %v4091, %v3665
  %v4093 = vmin.f32 %v4092, %v3681
  %v4094 = vmin.f32 %v4093, %v3697
  %v4095 = vmin.f32 %v4094, %v3713
  %v4096 = vmin.f32 %v4095, %v3729
  %v4097 = vmin.f32 %v4096, %v3745
  %v4098 = vmin.f32 %v4097, %v3761
  %v4099 = vmin.f32 %v4098, %v3777
  %v4100 = vmin.f32 %v4099, %v3793
  %v4101 = vmin.f32 %v4100, %v3809
  %v4102 = vmin.f32 %v4101, %v3825
  %v4103 = vmin.f32 %v4102, %v3841
  %v4104 = vmin.f32 %v4103, %v3857
  %v4105 = vmin.f32 %v4104, %v3873
  %v4106 = vmin.f32 %v4105, %v3889
  %v4107 = vmin.f32 %v4106, %v3905
  %v4108 = vmin.f32 %v4107, %v3921
  %v4109 = vrot.slane %v4108, 4
  %v4110 = vmin.f32 %v4108, %v4109
  %v4111 = vrot.slane %v4110, 2
  %v4112 = vmin.f32 %v4110, %v4111
  %v4113 = vrot.slane %v4112, 1
  %v4114 = vmin.f32 %v4112, %v4113
  %v4115 = vmin.f32 %v3426, %v3442
  %v4116 = vmin.f32 %v4115, %v3458
  %v4117 = vmin.f32 %v4116, %v3474
  %v4118 = vmin.f32 %v4117, %v3490
  %v4119 = vmin.f32 %v4118, %v3506
  %v4120 = vmin.f32 %v4119, %v3522
  %v4121 = vmin.f32 %v4120, %v3538
  %v4122 = vmin.f32 %v4121, %v3554
  %v4123 = vmin.f32 %v4122, %v3570
  %v4124 = vmin.f32 %v4123, %v3586
  %v4125 = vmin.f32 %v4124, %v3602
  %v4126 = vmin.f32 %v4125, %v3618
  %v4127 = vmin.f32 %v4126, %v3634
  %v4128 = vmin.f32 %v4127, %v3650
  %v4129 = vmin.f32 %v4128, %v3666
  %v4130 = vmin.f32 %v4129, %v3682
  %v4131 = vmin.f32 %v4130, %v3698
  %v4132 = vmin.f32 %v4131, %v3714
  %v4133 = vmin.f32 %v4132, %v3730
  %v4134 = vmin.f32 %v4133, %v3746
  %v4135 = vmin.f32 %v4134, %v3762
  %v4136 = vmin.f32 %v4135, %v3778
  %v4137 = vmin.f32 %v4136, %v3794
  %v4138 = vmin.f32 %v4137, %v3810
  %v4139 = vmin.f32 %v4138, %v3826
  %v4140 = vmin.f32 %v4139, %v3842
  %v4141 = vmin.f32 %v4140, %v3858
  %v4142 = vmin.f32 %v4141, %v3874
  %v4143 = vmin.f32 %v4142, %v3890
  %v4144 = vmin.f32 %v4143, %v3906
  %v4145 = vmin.f32 %v4144, %v3922
  %v4146 = vrot.slane %v4145, 4
  %v4147 = vmin.f32 %v4145, %v4146
  %v4148 = vrot.slane %v4147, 2
  %v4149 = vmin.f32 %v4147, %v4148
  %v4150 = vrot.slane %v4149, 1
  %v4151 = vmin.f32 %v4149, %v4150
  %v4152 = vmin.f32 %v3427, %v3443
  %v4153 = vmin.f32 %v4152, %v3459
  %v4154 = vmin.f32 %v4153, %v3475
  %v4155 = vmin.f32 %v4154, %v3491
  %v4156 = vmin.f32 %v4155, %v3507
  %v4157 = vmin.f32 %v4156, %v3523
  %v4158 = vmin.f32 %v4157, %v3539
  %v4159 = vmin.f32 %v4158, %v3555
  %v4160 = vmin.f32 %v4159, %v3571
  %v4161 = vmin.f32 %v4160, %v3587
  %v4162 = vmin.f32 %v4161, %v3603
  %v4163 = vmin.f32 %v4162, %v3619
  %v4164 = vmin.f32 %v4163, %v3635
  %v4165 = vmin.f32 %v4164, %v3651
  %v4166 = vmin.f32 %v4165, %v3667
  %v4167 = vmin.f32 %v4166, %v3683
  %v4168 = vmin.f32 %v4167, %v3699
  %v4169 = vmin.f32 %v4168, %v3715
  %v4170 = vmin.f32 %v4169, %v3731
  %v4171 = vmin.f32 %v4170, %v3747
  %v4172 = vmin.f32 %v4171, %v3763
  %v4173 = vmin.f32 %v4172, %v3779
  %v4174 = vmin.f32 %v4173, %v3795
  %v4175 = vmin.f32 %v4174, %v3811
  %v4176 = vmin.f32 %v4175, %v3827
  %v4177 = vmin.f32 %v4176, %v3843
  %v4178 = vmin.f32 %v4177, %v3859
  %v4179 = vmin.f32 %v4178, %v3875
  %v4180 = vmin.f32 %v4179, %v3891
  %v4181 = vmin.f32 %v4180, %v3907
  %v4182 = vmin.f32 %v4181, %v3923
  %v4183 = vrot.slane %v4182, 4
  %v4184 = vmin.f32 %v4182, %v4183
  %v4185 = vrot.slane %v4184, 2
  %v4186 = vmin.f32 %v4184, %v4185
  %v4187 = vrot.slane %v4186, 1
  %v4188 = vmin.f32 %v4186, %v4187
  %v4189 = vmin.f32 %v3428, %v3444
  %v4190 = vmin.f32 %v4189, %v3460
  %v4191 = vmin.f32 %v4190, %v3476
  %v4192 = vmin.f32 %v4191, %v3492
  %v4193 = vmin.f32 %v4192, %v3508
  %v4194 = vmin.f32 %v4193, %v3524
  %v4195 = vmin.f32 %v4194, %v3540
  %v4196 = vmin.f32 %v4195, %v3556
  %v4197 = vmin.f32 %v4196, %v3572
  %v4198 = vmin.f32 %v4197, %v3588
  %v4199 = vmin.f32 %v4198, %v3604
  %v4200 = vmin.f32 %v4199, %v3620
  %v4201 = vmin.f32 %v4200, %v3636
  %v4202 = vmin.f32 %v4201, %v3652
  %v4203 = vmin.f32 %v4202, %v3668
  %v4204 = vmin.f32 %v4203, %v3684
  %v4205 = vmin.f32 %v4204, %v3700
  %v4206 = vmin.f32 %v4205, %v3716
  %v4207 = vmin.f32 %v4206, %v3732
  %v4208 = vmin.f32 %v4207, %v3748
  %v4209 = vmin.f32 %v4208, %v3764
  %v4210 = vmin.f32 %v4209, %v3780
  %v4211 = vmin.f32 %v4210, %v3796
  %v4212 = vmin.f32 %v4211, %v3812
  %v4213 = vmin.f32 %v4212, %v3828
  %v4214 = vmin.f32 %v4213, %v3844
  %v4215 = vmin.f32 %v4214, %v3860
  %v4216 = vmin.f32 %v4215, %v3876
  %v4217 = vmin.f32 %v4216, %v3892
  %v4218 = vmin.f32 %v4217, %v3908
  %v4219 = vmin.f32 %v4218, %v3924
  %v4220 = vrot.slane %v4219, 4
  %v4221 = vmin.f32 %v4219, %v4220
  %v4222 = vrot.slane %v4221, 2
  %v4223 = vmin.f32 %v4221, %v4222
  %v4224 = vrot.slane %v4223, 1
  %v4225 = vmin.f32 %v4223, %v4224
  %v4226 = vmin.f32 %v3429, %v3445
  %v4227 = vmin.f32 %v4226, %v3461
  %v4228 = vmin.f32 %v4227, %v3477
  %v4229 = vmin.f32 %v4228, %v3493
  %v4230 = vmin.f32 %v4229, %v3509
  %v4231 = vmin.f32 %v4230, %v3525
  %v4232 = vmin.f32 %v4231, %v3541
  %v4233 = vmin.f32 %v4232, %v3557
  %v4234 = vmin.f32 %v4233, %v3573
  %v4235 = vmin.f32 %v4234, %v3589
  %v4236 = vmin.f32 %v4235, %v3605
  %v4237 = vmin.f32 %v4236, %v3621
  %v4238 = vmin.f32 %v4237, %v3637
  %v4239 = vmin.f32 %v4238, %v3653
  %v4240 = vmin.f32 %v4239, %v3669
  %v4241 = vmin.f32 %v4240, %v3685
  %v4242 = vmin.f32 %v4241, %v3701
  %v4243 = vmin.f32 %v4242, %v3717
  %v4244 = vmin.f32 %v4243, %v3733
  %v4245 = vmin.f32 %v4244, %v3749
  %v4246 = vmin.f32 %v4245, %v3765
  %v4247 = vmin.f32 %v4246, %v3781
  %v4248 = vmin.f32 %v4247, %v3797
  %v4249 = vmin.f32 %v4248, %v3813
  %v4250 = vmin.f32 %v4249, %v3829
  %v4251 = vmin.f32 %v4250, %v3845
  %v4252 = vmin.f32 %v4251, %v3861
  %v4253 = vmin.f32 %v4252, %v3877
  %v4254 = vmin.f32 %v4253, %v3893
  %v4255 = vmin.f32 %v4254, %v3909
  %v4256 = vmin.f32 %v4255, %v3925
  %v4257 = vrot.slane %v4256, 4
  %v4258 = vmin.f32 %v4256, %v4257
  %v4259 = vrot.slane %v4258, 2
  %v4260 = vmin.f32 %v4258, %v4259
  %v4261 = vrot.slane %v4260, 1
  %v4262 = vmin.f32 %v4260, %v4261
  %v4263 = vmin.f32 %v3430, %v3446
  %v4264 = vmin.f32 %v4263, %v3462
  %v4265 = vmin.f32 %v4264, %v3478
  %v4266 = vmin.f32 %v4265, %v3494
  %v4267 = vmin.f32 %v4266, %v3510
  %v4268 = vmin.f32 %v4267, %v3526
  %v4269 = vmin.f32 %v4268, %v3542
  %v4270 = vmin.f32 %v4269, %v3558
  %v4271 = vmin.f32 %v4270, %v3574
  %v4272 = vmin.f32 %v4271, %v3590
  %v4273 = vmin.f32 %v4272, %v3606
  %v4274 = vmin.f32 %v4273, %v3622
  %v4275 = vmin.f32 %v4274, %v3638
  %v4276 = vmin.f32 %v4275, %v3654
  %v4277 = vmin.f32 %v4276, %v3670
  %v4278 = vmin.f32 %v4277, %v3686
  %v4279 = vmin.f32 %v4278, %v3702
  %v4280 = vmin.f32 %v4279, %v3718
  %v4281 = vmin.f32 %v4280, %v3734
  %v4282 = vmin.f32 %v4281, %v3750
  %v4283 = vmin.f32 %v4282, %v3766
  %v4284 = vmin.f32 %v4283, %v3782
  %v4285 = vmin.f32 %v4284, %v3798
  %v4286 = vmin.f32 %v4285, %v3814
  %v4287 = vmin.f32 %v4286, %v3830
  %v4288 = vmin.f32 %v4287, %v3846
  %v4289 = vmin.f32 %v4288, %v3862
  %v4290 = vmin.f32 %v4289, %v3878
  %v4291 = vmin.f32 %v4290, %v3894
  %v4292 = vmin.f32 %v4291, %v3910
  %v4293 = vmin.f32 %v4292, %v3926
  %v4294 = vrot.slane %v4293, 4
  %v4295 = vmin.f32 %v4293, %v4294
  %v4296 = vrot.slane %v4295, 2
  %v4297 = vmin.f32 %v4295, %v4296
  %v4298 = vrot.slane %v4297, 1
  %v4299 = vmin.f32 %v4297, %v4298
  %v4300 = vmin.f32 %v3431, %v3447
  %v4301 = vmin.f32 %v4300, %v3463
  %v4302 = vmin.f32 %v4301, %v3479
  %v4303 = vmin.f32 %v4302, %v3495
  %v4304 = vmin.f32 %v4303, %v3511
  %v4305 = vmin.f32 %v4304, %v3527
  %v4306 = vmin.f32 %v4305, %v3543
  %v4307 = vmin.f32 %v4306, %v3559
  %v4308 = vmin.f32 %v4307, %v3575
  %v4309 = vmin.f32 %v4308, %v3591
  %v4310 = vmin.f32 %v4309, %v3607
  %v4311 = vmin.f32 %v4310, %v3623
  %v4312 = vmin.f32 %v4311, %v3639
  %v4313 = vmin.f32 %v4312, %v3655
  %v4314 = vmin.f32 %v4313, %v3671
  %v4315 = vmin.f32 %v4314, %v3687
  %v4316 = vmin.f32 %v4315, %v3703
  %v4317 = vmin.f32 %v4316, %v3719
  %v4318 = vmin.f32 %v4317, %v3735
  %v4319 = vmin.f32 %v4318, %v3751
  %v4320 = vmin.f32 %v4319, %v3767
  %v4321 = vmin.f32 %v4320, %v3783
  %v4322 = vmin.f32 %v4321, %v3799
  %v4323 = vmin.f32 %v4322, %v3815
  %v4324 = vmin.f32 %v4323, %v3831
  %v4325 = vmin.f32 %v4324, %v3847
  %v4326 = vmin.f32 %v4325, %v3863
  %v4327 = vmin.f32 %v4326, %v3879
  %v4328 = vmin.f32 %v4327, %v3895
  %v4329 = vmin.f32 %v4328, %v3911
  %v4330 = vmin.f32 %v4329, %v3927
  %v4331 = vrot.slane %v4330, 4
  %v4332 = vmin.f32 %v4330, %v4331
  %v4333 = vrot.slane %v4332, 2
  %v4334 = vmin.f32 %v4332, %v4333
  %v4335 = vrot.slane %v4334, 1
  %v4336 = vmin.f32 %v4334, %v4335
  %v4337 = vmin.f32 %v3432, %v3448
  %v4338 = vmin.f32 %v4337, %v3464
  %v4339 = vmin.f32 %v4338, %v3480
  %v4340 = vmin.f32 %v4339, %v3496
  %v4341 = vmin.f32 %v4340, %v3512
  %v4342 = vmin.f32 %v4341, %v3528
  %v4343 = vmin.f32 %v4342, %v3544
  %v4344 = vmin.f32 %v4343, %v3560
  %v4345 = vmin.f32 %v4344, %v3576
  %v4346 = vmin.f32 %v4345, %v3592
  %v4347 = vmin.f32 %v4346, %v3608
  %v4348 = vmin.f32 %v4347, %v3624
  %v4349 = vmin.f32 %v4348, %v3640
  %v4350 = vmin.f32 %v4349, %v3656
  %v4351 = vmin.f32 %v4350, %v3672
  %v4352 = vmin.f32 %v4351, %v3688
  %v4353 = vmin.f32 %v4352, %v3704
  %v4354 = vmin.f32 %v4353, %v3720
  %v4355 = vmin.f32 %v4354, %v3736
  %v4356 = vmin.f32 %v4355, %v3752
  %v4357 = vmin.f32 %v4356, %v3768
  %v4358 = vmin.f32 %v4357, %v3784
  %v4359 = vmin.f32 %v4358, %v3800
  %v4360 = vmin.f32 %v4359, %v3816
  %v4361 = vmin.f32 %v4360, %v3832
  %v4362 = vmin.f32 %v4361, %v3848
  %v4363 = vmin.f32 %v4362, %v3864
  %v4364 = vmin.f32 %v4363, %v3880
  %v4365 = vmin.f32 %v4364, %v3896
  %v4366 = vmin.f32 %v4365, %v3912
  %v4367 = vmin.f32 %v4366, %v3928
  %v4368 = vrot.slane %v4367, 4
  %v4369 = vmin.f32 %v4367, %v4368
  %v4370 = vrot.slane %v4369, 2
  %v4371 = vmin.f32 %v4369, %v4370
  %v4372 = vrot.slane %v4371, 1
  %v4373 = vmin.f32 %v4371, %v4372
  %v4374 = vmin.f32 %v3433, %v3449
  %v4375 = vmin.f32 %v4374, %v3465
  %v4376 = vmin.f32 %v4375, %v3481
  %v4377 = vmin.f32 %v4376, %v3497
  %v4378 = vmin.f32 %v4377, %v3513
  %v4379 = vmin.f32 %v4378, %v3529
  %v4380 = vmin.f32 %v4379, %v3545
  %v4381 = vmin.f32 %v4380, %v3561
  %v4382 = vmin.f32 %v4381, %v3577
  %v4383 = vmin.f32 %v4382, %v3593
  %v4384 = vmin.f32 %v4383, %v3609
  %v4385 = vmin.f32 %v4384, %v3625
  %v4386 = vmin.f32 %v4385, %v3641
  %v4387 = vmin.f32 %v4386, %v3657
  %v4388 = vmin.f32 %v4387, %v3673
  %v4389 = vmin.f32 %v4388, %v3689
  %v4390 = vmin.f32 %v4389, %v3705
  %v4391 = vmin.f32 %v4390, %v3721
  %v4392 = vmin.f32 %v4391, %v3737
  %v4393 = vmin.f32 %v4392, %v3753
  %v4394 = vmin.f32 %v4393, %v3769
  %v4395 = vmin.f32 %v4394, %v3785
  %v4396 = vmin.f32 %v4395, %v3801
  %v4397 = vmin.f32 %v4396, %v3817
  %v4398 = vmin.f32 %v4397, %v3833
  %v4399 = vmin.f32 %v4398, %v3849
  %v4400 = vmin.f32 %v4399, %v3865
  %v4401 = vmin.f32 %v4400, %v3881
  %v4402 = vmin.f32 %v4401, %v3897
  %v4403 = vmin.f32 %v4402, %v3913
  %v4404 = vmin.f32 %v4403, %v3929
  %v4405 = vrot.slane %v4404, 4
  %v4406 = vmin.f32 %v4404, %v4405
  %v4407 = vrot.slane %v4406, 2
  %v4408 = vmin.f32 %v4406, %v4407
  %v4409 = vrot.slane %v4408, 1
  %v4410 = vmin.f32 %v4408, %v4409
  %v4411 = vmin.f32 %v3434, %v3450
  %v4412 = vmin.f32 %v4411, %v3466
  %v4413 = vmin.f32 %v4412, %v3482
  %v4414 = vmin.f32 %v4413, %v3498
  %v4415 = vmin.f32 %v4414, %v3514
  %v4416 = vmin.f32 %v4415, %v3530
  %v4417 = vmin.f32 %v4416, %v3546
  %v4418 = vmin.f32 %v4417, %v3562
  %v4419 = vmin.f32 %v4418, %v3578
  %v4420 = vmin.f32 %v4419, %v3594
  %v4421 = vmin.f32 %v4420, %v3610
  %v4422 = vmin.f32 %v4421, %v3626
  %v4423 = vmin.f32 %v4422, %v3642
  %v4424 = vmin.f32 %v4423, %v3658
  %v4425 = vmin.f32 %v4424, %v3674
  %v4426 = vmin.f32 %v4425, %v3690
  %v4427 = vmin.f32 %v4426, %v3706
  %v4428 = vmin.f32 %v4427, %v3722
  %v4429 = vmin.f32 %v4428, %v3738
  %v4430 = vmin.f32 %v4429, %v3754
  %v4431 = vmin.f32 %v4430, %v3770
  %v4432 = vmin.f32 %v4431, %v3786
  %v4433 = vmin.f32 %v4432, %v3802
  %v4434 = vmin.f32 %v4433, %v3818
  %v4435 = vmin.f32 %v4434, %v3834
  %v4436 = vmin.f32 %v4435, %v3850
  %v4437 = vmin.f32 %v4436, %v3866
  %v4438 = vmin.f32 %v4437, %v3882
  %v4439 = vmin.f32 %v4438, %v3898
  %v4440 = vmin.f32 %v4439, %v3914
  %v4441 = vmin.f32 %v4440, %v3930
  %v4442 = vrot.slane %v4441, 4
  %v4443 = vmin.f32 %v4441, %v4442
  %v4444 = vrot.slane %v4443, 2
  %v4445 = vmin.f32 %v4443, %v4444
  %v4446 = vrot.slane %v4445, 1
  %v4447 = vmin.f32 %v4445, %v4446
  %v4448 = vmin.f32 %v3435, %v3451
  %v4449 = vmin.f32 %v4448, %v3467
  %v4450 = vmin.f32 %v4449, %v3483
  %v4451 = vmin.f32 %v4450, %v3499
  %v4452 = vmin.f32 %v4451, %v3515
  %v4453 = vmin.f32 %v4452, %v3531
  %v4454 = vmin.f32 %v4453, %v3547
  %v4455 = vmin.f32 %v4454, %v3563
  %v4456 = vmin.f32 %v4455, %v3579
  %v4457 = vmin.f32 %v4456, %v3595
  %v4458 = vmin.f32 %v4457, %v3611
  %v4459 = vmin.f32 %v4458, %v3627
  %v4460 = vmin.f32 %v4459, %v3643
  %v4461 = vmin.f32 %v4460, %v3659
  %v4462 = vmin.f32 %v4461, %v3675
  %v4463 = vmin.f32 %v4462, %v3691
  %v4464 = vmin.f32 %v4463, %v3707
  %v4465 = vmin.f32 %v4464, %v3723
  %v4466 = vmin.f32 %v4465, %v3739
  %v4467 = vmin.f32 %v4466, %v3755
  %v4468 = vmin.f32 %v4467, %v3771
  %v4469 = vmin.f32 %v4468, %v3787
  %v4470 = vmin.f32 %v4469, %v3803
  %v4471 = vmin.f32 %v4470, %v3819
  %v4472 = vmin.f32 %v4471, %v3835
  %v4473 = vmin.f32 %v4472, %v3851
  %v4474 = vmin.f32 %v4473, %v3867
  %v4475 = vmin.f32 %v4474, %v3883
  %v4476 = vmin.f32 %v4475, %v3899
  %v4477 = vmin.f32 %v4476, %v3915
  %v4478 = vmin.f32 %v4477, %v3931
  %v4479 = vrot.slane %v4478, 4
  %v4480 = vmin.f32 %v4478, %v4479
  %v4481 = vrot.slane %v4480, 2
  %v4482 = vmin.f32 %v4480, %v4481
  %v4483 = vrot.slane %v4482, 1
  %v4484 = vmin.f32 %v4482, %v4483
  %v4485 = vmin.f32 %v3436, %v3452
  %v4486 = vmin.f32 %v4485, %v3468
  %v4487 = vmin.f32 %v4486, %v3484
  %v4488 = vmin.f32 %v4487, %v3500
  %v4489 = vmin.f32 %v4488, %v3516
  %v4490 = vmin.f32 %v4489, %v3532
  %v4491 = vmin.f32 %v4490, %v3548
  %v4492 = vmin.f32 %v4491, %v3564
  %v4493 = vmin.f32 %v4492, %v3580
  %v4494 = vmin.f32 %v4493, %v3596
  %v4495 = vmin.f32 %v4494, %v3612
  %v4496 = vmin.f32 %v4495, %v3628
  %v4497 = vmin.f32 %v4496, %v3644
  %v4498 = vmin.f32 %v4497, %v3660
  %v4499 = vmin.f32 %v4498, %v3676
  %v4500 = vmin.f32 %v4499, %v3692
  %v4501 = vmin.f32 %v4500, %v3708
  %v4502 = vmin.f32 %v4501, %v3724
  %v4503 = vmin.f32 %v4502, %v3740
  %v4504 = vmin.f32 %v4503, %v3756
  %v4505 = vmin.f32 %v4504, %v3772
  %v4506 = vmin.f32 %v4505, %v3788
  %v4507 = vmin.f32 %v4506, %v3804
  %v4508 = vmin.f32 %v4507, %v3820
  %v4509 = vmin.f32 %v4508, %v3836
  %v4510 = vmin.f32 %v4509, %v3852
  %v4511 = vmin.f32 %v4510, %v3868
  %v4512 = vmin.f32 %v4511, %v3884
  %v4513 = vmin.f32 %v4512, %v3900
  %v4514 = vmin.f32 %v4513, %v3916
  %v4515 = vmin.f32 %v4514, %v3932
  %v4516 = vrot.slane %v4515, 4
  %v4517 = vmin.f32 %v4515, %v4516
  %v4518 = vrot.slane %v4517, 2
  %v4519 = vmin.f32 %v4517, %v4518
  %v4520 = vrot.slane %v4519, 1
  %v4521 = vmin.f32 %v4519, %v4520
  %v4522 = vmin.f32 %v3437, %v3453
  %v4523 = vmin.f32 %v4522, %v3469
  %v4524 = vmin.f32 %v4523, %v3485
  %v4525 = vmin.f32 %v4524, %v3501
  %v4526 = vmin.f32 %v4525, %v3517
  %v4527 = vmin.f32 %v4526, %v3533
  %v4528 = vmin.f32 %v4527, %v3549
  %v4529 = vmin.f32 %v4528, %v3565
  %v4530 = vmin.f32 %v4529, %v3581
  %v4531 = vmin.f32 %v4530, %v3597
  %v4532 = vmin.f32 %v4531, %v3613
  %v4533 = vmin.f32 %v4532, %v3629
  %v4534 = vmin.f32 %v4533, %v3645
  %v4535 = vmin.f32 %v4534, %v3661
  %v4536 = vmin.f32 %v4535, %v3677
  %v4537 = vmin.f32 %v4536, %v3693
  %v4538 = vmin.f32 %v4537, %v3709
  %v4539 = vmin.f32 %v4538, %v3725
  %v4540 = vmin.f32 %v4539, %v3741
  %v4541 = vmin.f32 %v4540, %v3757
  %v4542 = vmin.f32 %v4541, %v3773
  %v4543 = vmin.f32 %v4542, %v3789
  %v4544 = vmin.f32 %v4543, %v3805
  %v4545 = vmin.f32 %v4544, %v3821
  %v4546 = vmin.f32 %v4545, %v3837
  %v4547 = vmin.f32 %v4546, %v3853
  %v4548 = vmin.f32 %v4547, %v3869
  %v4549 = vmin.f32 %v4548, %v3885
  %v4550 = vmin.f32 %v4549, %v3901
  %v4551 = vmin.f32 %v4550, %v3917
  %v4552 = vmin.f32 %v4551, %v3933
  %v4553 = vrot.slane %v4552, 4
  %v4554 = vmin.f32 %v4552, %v4553
  %v4555 = vrot.slane %v4554, 2
  %v4556 = vmin.f32 %v4554, %v4555
  %v4557 = vrot.slane %v4556, 1
  %v4558 = vmin.f32 %v4556, %v4557
  %vm4559 = vcmp.eq.f32.partialorder %v3422, %v4003
  %vm4560 = vcmp.eq.f32.partialorder %v3423, %v4040
  %vm4561 = vcmp.eq.f32.partialorder %v3424, %v4077
  %vm4562 = vcmp.eq.f32.partialorder %v3425, %v4114
  %vm4563 = vcmp.eq.f32.partialorder %v3426, %v4151
  %vm4564 = vcmp.eq.f32.partialorder %v3427, %v4188
  %vm4565 = vcmp.eq.f32.partialorder %v3428, %v4225
  %vm4566 = vcmp.eq.f32.partialorder %v3429, %v4262
  %vm4567 = vcmp.eq.f32.partialorder %v3430, %v4299
  %vm4568 = vcmp.eq.f32.partialorder %v3431, %v4336
  %vm4569 = vcmp.eq.f32.partialorder %v3432, %v4373
  %vm4570 = vcmp.eq.f32.partialorder %v3433, %v4410
  %vm4571 = vcmp.eq.f32.partialorder %v3434, %v4447
  %vm4572 = vcmp.eq.f32.partialorder %v3435, %v4484
  %vm4573 = vcmp.eq.f32.partialorder %v3436, %v4521
  %vm4574 = vcmp.eq.f32.partialorder %v3437, %v4558
  %vm4575 = vcmp.eq.f32.partialorder %v3438, %v4003
  %vm4576 = vcmp.eq.f32.partialorder %v3439, %v4040
  %vm4577 = vcmp.eq.f32.partialorder %v3440, %v4077
  %vm4578 = vcmp.eq.f32.partialorder %v3441, %v4114
  %vm4579 = vcmp.eq.f32.partialorder %v3442, %v4151
  %vm4580 = vcmp.eq.f32.partialorder %v3443, %v4188
  %vm4581 = vcmp.eq.f32.partialorder %v3444, %v4225
  %vm4582 = vcmp.eq.f32.partialorder %v3445, %v4262
  %vm4583 = vcmp.eq.f32.partialorder %v3446, %v4299
  %vm4584 = vcmp.eq.f32.partialorder %v3447, %v4336
  %vm4585 = vcmp.eq.f32.partialorder %v3448, %v4373
  %vm4586 = vcmp.eq.f32.partialorder %v3449, %v4410
  %vm4587 = vcmp.eq.f32.partialorder %v3450, %v4447
  %vm4588 = vcmp.eq.f32.partialorder %v3451, %v4484
  %vm4589 = vcmp.eq.f32.partialorder %v3452, %v4521
  %vm4590 = vcmp.eq.f32.partialorder %v3453, %v4558
  %vm4591 = vcmp.eq.f32.partialorder %v3454, %v4003
  %vm4592 = vcmp.eq.f32.partialorder %v3455, %v4040
  %vm4593 = vcmp.eq.f32.partialorder %v3456, %v4077
  %vm4594 = vcmp.eq.f32.partialorder %v3457, %v4114
  %vm4595 = vcmp.eq.f32.partialorder %v3458, %v4151
  %vm4596 = vcmp.eq.f32.partialorder %v3459, %v4188
  %vm4597 = vcmp.eq.f32.partialorder %v3460, %v4225
  %vm4598 = vcmp.eq.f32.partialorder %v3461, %v4262
  %vm4599 = vcmp.eq.f32.partialorder %v3462, %v4299
  %vm4600 = vcmp.eq.f32.partialorder %v3463, %v4336
  %vm4601 = vcmp.eq.f32.partialorder %v3464, %v4373
  %vm4602 = vcmp.eq.f32.partialorder %v3465, %v4410
  %vm4603 = vcmp.eq.f32.partialorder %v3466, %v4447
  %vm4604 = vcmp.eq.f32.partialorder %v3467, %v4484
  %vm4605 = vcmp.eq.f32.partialorder %v3468, %v4521
  %vm4606 = vcmp.eq.f32.partialorder %v3469, %v4558
  %vm4607 = vcmp.eq.f32.partialorder %v3470, %v4003
  %vm4608 = vcmp.eq.f32.partialorder %v3471, %v4040
  %vm4609 = vcmp.eq.f32.partialorder %v3472, %v4077
  %vm4610 = vcmp.eq.f32.partialorder %v3473, %v4114
  %vm4611 = vcmp.eq.f32.partialorder %v3474, %v4151
  %vm4612 = vcmp.eq.f32.partialorder %v3475, %v4188
  %vm4613 = vcmp.eq.f32.partialorder %v3476, %v4225
  %vm4614 = vcmp.eq.f32.partialorder %v3477, %v4262
  %vm4615 = vcmp.eq.f32.partialorder %v3478, %v4299
  %vm4616 = vcmp.eq.f32.partialorder %v3479, %v4336
  %vm4617 = vcmp.eq.f32.partialorder %v3480, %v4373
  %vm4618 = vcmp.eq.f32.partialorder %v3481, %v4410
  %vm4619 = vcmp.eq.f32.partialorder %v3482, %v4447
  %vm4620 = vcmp.eq.f32.partialorder %v3483, %v4484
  %vm4621 = vcmp.eq.f32.partialorder %v3484, %v4521
  %vm4622 = vcmp.eq.f32.partialorder %v3485, %v4558
  %vm4623 = vcmp.eq.f32.partialorder %v3486, %v4003
  %vm4624 = vcmp.eq.f32.partialorder %v3487, %v4040
  %vm4625 = vcmp.eq.f32.partialorder %v3488, %v4077
  %vm4626 = vcmp.eq.f32.partialorder %v3489, %v4114
  %vm4627 = vcmp.eq.f32.partialorder %v3490, %v4151
  %vm4628 = vcmp.eq.f32.partialorder %v3491, %v4188
  %vm4629 = vcmp.eq.f32.partialorder %v3492, %v4225
  %vm4630 = vcmp.eq.f32.partialorder %v3493, %v4262
  %vm4631 = vcmp.eq.f32.partialorder %v3494, %v4299
  %vm4632 = vcmp.eq.f32.partialorder %v3495, %v4336
  %vm4633 = vcmp.eq.f32.partialorder %v3496, %v4373
  %vm4634 = vcmp.eq.f32.partialorder %v3497, %v4410
  %vm4635 = vcmp.eq.f32.partialorder %v3498, %v4447
  %vm4636 = vcmp.eq.f32.partialorder %v3499, %v4484
  %vm4637 = vcmp.eq.f32.partialorder %v3500, %v4521
  %vm4638 = vcmp.eq.f32.partialorder %v3501, %v4558
  %vm4639 = vcmp.eq.f32.partialorder %v3502, %v4003
  %vm4640 = vcmp.eq.f32.partialorder %v3503, %v4040
  %vm4641 = vcmp.eq.f32.partialorder %v3504, %v4077
  %vm4642 = vcmp.eq.f32.partialorder %v3505, %v4114
  %vm4643 = vcmp.eq.f32.partialorder %v3506, %v4151
  %vm4644 = vcmp.eq.f32.partialorder %v3507, %v4188
  %vm4645 = vcmp.eq.f32.partialorder %v3508, %v4225
  %vm4646 = vcmp.eq.f32.partialorder %v3509, %v4262
  %vm4647 = vcmp.eq.f32.partialorder %v3510, %v4299
  %vm4648 = vcmp.eq.f32.partialorder %v3511, %v4336
  %vm4649 = vcmp.eq.f32.partialorder %v3512, %v4373
  %vm4650 = vcmp.eq.f32.partialorder %v3513, %v4410
  %vm4651 = vcmp.eq.f32.partialorder %v3514, %v4447
  %vm4652 = vcmp.eq.f32.partialorder %v3515, %v4484
  %vm4653 = vcmp.eq.f32.partialorder %v3516, %v4521
  %vm4654 = vcmp.eq.f32.partialorder %v3517, %v4558
  %vm4655 = vcmp.eq.f32.partialorder %v3518, %v4003
  %vm4656 = vcmp.eq.f32.partialorder %v3519, %v4040
  %vm4657 = vcmp.eq.f32.partialorder %v3520, %v4077
  %vm4658 = vcmp.eq.f32.partialorder %v3521, %v4114
  %vm4659 = vcmp.eq.f32.partialorder %v3522, %v4151
  %vm4660 = vcmp.eq.f32.partialorder %v3523, %v4188
  %vm4661 = vcmp.eq.f32.partialorder %v3524, %v4225
  %vm4662 = vcmp.eq.f32.partialorder %v3525, %v4262
  %vm4663 = vcmp.eq.f32.partialorder %v3526, %v4299
  %vm4664 = vcmp.eq.f32.partialorder %v3527, %v4336
  %vm4665 = vcmp.eq.f32.partialorder %v3528, %v4373
  %vm4666 = vcmp.eq.f32.partialorder %v3529, %v4410
  %vm4667 = vcmp.eq.f32.partialorder %v3530, %v4447
  %vm4668 = vcmp.eq.f32.partialorder %v3531, %v4484
  %vm4669 = vcmp.eq.f32.partialorder %v3532, %v4521
  %vm4670 = vcmp.eq.f32.partialorder %v3533, %v4558
  %vm4671 = vcmp.eq.f32.partialorder %v3534, %v4003
  %vm4672 = vcmp.eq.f32.partialorder %v3535, %v4040
  %vm4673 = vcmp.eq.f32.partialorder %v3536, %v4077
  %vm4674 = vcmp.eq.f32.partialorder %v3537, %v4114
  %vm4675 = vcmp.eq.f32.partialorder %v3538, %v4151
  %vm4676 = vcmp.eq.f32.partialorder %v3539, %v4188
  %vm4677 = vcmp.eq.f32.partialorder %v3540, %v4225
  %vm4678 = vcmp.eq.f32.partialorder %v3541, %v4262
  %vm4679 = vcmp.eq.f32.partialorder %v3542, %v4299
  %vm4680 = vcmp.eq.f32.partialorder %v3543, %v4336
  %vm4681 = vcmp.eq.f32.partialorder %v3544, %v4373
  %vm4682 = vcmp.eq.f32.partialorder %v3545, %v4410
  %vm4683 = vcmp.eq.f32.partialorder %v3546, %v4447
  %vm4684 = vcmp.eq.f32.partialorder %v3547, %v4484
  %vm4685 = vcmp.eq.f32.partialorder %v3548, %v4521
  %vm4686 = vcmp.eq.f32.partialorder %v3549, %v4558
  %vm4687 = vcmp.eq.f32.partialorder %v3550, %v4003
  %vm4688 = vcmp.eq.f32.partialorder %v3551, %v4040
  %vm4689 = vcmp.eq.f32.partialorder %v3552, %v4077
  %vm4690 = vcmp.eq.f32.partialorder %v3553, %v4114
  %vm4691 = vcmp.eq.f32.partialorder %v3554, %v4151
  %vm4692 = vcmp.eq.f32.partialorder %v3555, %v4188
  %vm4693 = vcmp.eq.f32.partialorder %v3556, %v4225
  %vm4694 = vcmp.eq.f32.partialorder %v3557, %v4262
  %vm4695 = vcmp.eq.f32.partialorder %v3558, %v4299
  %vm4696 = vcmp.eq.f32.partialorder %v3559, %v4336
  %vm4697 = vcmp.eq.f32.partialorder %v3560, %v4373
  %vm4698 = vcmp.eq.f32.partialorder %v3561, %v4410
  %vm4699 = vcmp.eq.f32.partialorder %v3562, %v4447
  %vm4700 = vcmp.eq.f32.partialorder %v3563, %v4484
  %vm4701 = vcmp.eq.f32.partialorder %v3564, %v4521
  %vm4702 = vcmp.eq.f32.partialorder %v3565, %v4558
  %vm4703 = vcmp.eq.f32.partialorder %v3566, %v4003
  %vm4704 = vcmp.eq.f32.partialorder %v3567, %v4040
  %vm4705 = vcmp.eq.f32.partialorder %v3568, %v4077
  %vm4706 = vcmp.eq.f32.partialorder %v3569, %v4114
  %vm4707 = vcmp.eq.f32.partialorder %v3570, %v4151
  %vm4708 = vcmp.eq.f32.partialorder %v3571, %v4188
  %vm4709 = vcmp.eq.f32.partialorder %v3572, %v4225
  %vm4710 = vcmp.eq.f32.partialorder %v3573, %v4262
  %vm4711 = vcmp.eq.f32.partialorder %v3574, %v4299
  %vm4712 = vcmp.eq.f32.partialorder %v3575, %v4336
  %vm4713 = vcmp.eq.f32.partialorder %v3576, %v4373
  %vm4714 = vcmp.eq.f32.partialorder %v3577, %v4410
  %vm4715 = vcmp.eq.f32.partialorder %v3578, %v4447
  %vm4716 = vcmp.eq.f32.partialorder %v3579, %v4484
  %vm4717 = vcmp.eq.f32.partialorder %v3580, %v4521
  %vm4718 = vcmp.eq.f32.partialorder %v3581, %v4558
  %vm4719 = vcmp.eq.f32.partialorder %v3582, %v4003
  %vm4720 = vcmp.eq.f32.partialorder %v3583, %v4040
  %vm4721 = vcmp.eq.f32.partialorder %v3584, %v4077
  %vm4722 = vcmp.eq.f32.partialorder %v3585, %v4114
  %vm4723 = vcmp.eq.f32.partialorder %v3586, %v4151
  %vm4724 = vcmp.eq.f32.partialorder %v3587, %v4188
  %vm4725 = vcmp.eq.f32.partialorder %v3588, %v4225
  %vm4726 = vcmp.eq.f32.partialorder %v3589, %v4262
  %vm4727 = vcmp.eq.f32.partialorder %v3590, %v4299
  %vm4728 = vcmp.eq.f32.partialorder %v3591, %v4336
  %vm4729 = vcmp.eq.f32.partialorder %v3592, %v4373
  %vm4730 = vcmp.eq.f32.partialorder %v3593, %v4410
  %vm4731 = vcmp.eq.f32.partialorder %v3594, %v4447
  %vm4732 = vcmp.eq.f32.partialorder %v3595, %v4484
  %vm4733 = vcmp.eq.f32.partialorder %v3596, %v4521
  %vm4734 = vcmp.eq.f32.partialorder %v3597, %v4558
  %vm4735 = vcmp.eq.f32.partialorder %v3598, %v4003
  %vm4736 = vcmp.eq.f32.partialorder %v3599, %v4040
  %vm4737 = vcmp.eq.f32.partialorder %v3600, %v4077
  %vm4738 = vcmp.eq.f32.partialorder %v3601, %v4114
  %vm4739 = vcmp.eq.f32.partialorder %v3602, %v4151
  %vm4740 = vcmp.eq.f32.partialorder %v3603, %v4188
  %vm4741 = vcmp.eq.f32.partialorder %v3604, %v4225
  %vm4742 = vcmp.eq.f32.partialorder %v3605, %v4262
  %vm4743 = vcmp.eq.f32.partialorder %v3606, %v4299
  %vm4744 = vcmp.eq.f32.partialorder %v3607, %v4336
  %vm4745 = vcmp.eq.f32.partialorder %v3608, %v4373
  %vm4746 = vcmp.eq.f32.partialorder %v3609, %v4410
  %vm4747 = vcmp.eq.f32.partialorder %v3610, %v4447
  %vm4748 = vcmp.eq.f32.partialorder %v3611, %v4484
  %vm4749 = vcmp.eq.f32.partialorder %v3612, %v4521
  %vm4750 = vcmp.eq.f32.partialorder %v3613, %v4558
  %vm4751 = vcmp.eq.f32.partialorder %v3614, %v4003
  %vm4752 = vcmp.eq.f32.partialorder %v3615, %v4040
  %vm4753 = vcmp.eq.f32.partialorder %v3616, %v4077
  %vm4754 = vcmp.eq.f32.partialorder %v3617, %v4114
  %vm4755 = vcmp.eq.f32.partialorder %v3618, %v4151
  %vm4756 = vcmp.eq.f32.partialorder %v3619, %v4188
  %vm4757 = vcmp.eq.f32.partialorder %v3620, %v4225
  %vm4758 = vcmp.eq.f32.partialorder %v3621, %v4262
  %vm4759 = vcmp.eq.f32.partialorder %v3622, %v4299
  %vm4760 = vcmp.eq.f32.partialorder %v3623, %v4336
  %vm4761 = vcmp.eq.f32.partialorder %v3624, %v4373
  %vm4762 = vcmp.eq.f32.partialorder %v3625, %v4410
  %vm4763 = vcmp.eq.f32.partialorder %v3626, %v4447
  %vm4764 = vcmp.eq.f32.partialorder %v3627, %v4484
  %vm4765 = vcmp.eq.f32.partialorder %v3628, %v4521
  %vm4766 = vcmp.eq.f32.partialorder %v3629, %v4558
  %vm4767 = vcmp.eq.f32.partialorder %v3630, %v4003
  %vm4768 = vcmp.eq.f32.partialorder %v3631, %v4040
  %vm4769 = vcmp.eq.f32.partialorder %v3632, %v4077
  %vm4770 = vcmp.eq.f32.partialorder %v3633, %v4114
  %vm4771 = vcmp.eq.f32.partialorder %v3634, %v4151
  %vm4772 = vcmp.eq.f32.partialorder %v3635, %v4188
  %vm4773 = vcmp.eq.f32.partialorder %v3636, %v4225
  %vm4774 = vcmp.eq.f32.partialorder %v3637, %v4262
  %vm4775 = vcmp.eq.f32.partialorder %v3638, %v4299
  %vm4776 = vcmp.eq.f32.partialorder %v3639, %v4336
  %vm4777 = vcmp.eq.f32.partialorder %v3640, %v4373
  %vm4778 = vcmp.eq.f32.partialorder %v3641, %v4410
  %vm4779 = vcmp.eq.f32.partialorder %v3642, %v4447
  %vm4780 = vcmp.eq.f32.partialorder %v3643, %v4484
  %vm4781 = vcmp.eq.f32.partialorder %v3644, %v4521
  %vm4782 = vcmp.eq.f32.partialorder %v3645, %v4558
  %vm4783 = vcmp.eq.f32.partialorder %v3646, %v4003
  %vm4784 = vcmp.eq.f32.partialorder %v3647, %v4040
  %vm4785 = vcmp.eq.f32.partialorder %v3648, %v4077
  %vm4786 = vcmp.eq.f32.partialorder %v3649, %v4114
  %vm4787 = vcmp.eq.f32.partialorder %v3650, %v4151
  %vm4788 = vcmp.eq.f32.partialorder %v3651, %v4188
  %vm4789 = vcmp.eq.f32.partialorder %v3652, %v4225
  %vm4790 = vcmp.eq.f32.partialorder %v3653, %v4262
  %vm4791 = vcmp.eq.f32.partialorder %v3654, %v4299
  %vm4792 = vcmp.eq.f32.partialorder %v3655, %v4336
  %vm4793 = vcmp.eq.f32.partialorder %v3656, %v4373
  %vm4794 = vcmp.eq.f32.partialorder %v3657, %v4410
  %vm4795 = vcmp.eq.f32.partialorder %v3658, %v4447
  %vm4796 = vcmp.eq.f32.partialorder %v3659, %v4484
  %vm4797 = vcmp.eq.f32.partialorder %v3660, %v4521
  %vm4798 = vcmp.eq.f32.partialorder %v3661, %v4558
  %vm4799 = vcmp.eq.f32.partialorder %v3662, %v4003
  %vm4800 = vcmp.eq.f32.partialorder %v3663, %v4040
  %vm4801 = vcmp.eq.f32.partialorder %v3664, %v4077
  %vm4802 = vcmp.eq.f32.partialorder %v3665, %v4114
  %vm4803 = vcmp.eq.f32.partialorder %v3666, %v4151
  %vm4804 = vcmp.eq.f32.partialorder %v3667, %v4188
  %vm4805 = vcmp.eq.f32.partialorder %v3668, %v4225
  %vm4806 = vcmp.eq.f32.partialorder %v3669, %v4262
  %vm4807 = vcmp.eq.f32.partialorder %v3670, %v4299
  %vm4808 = vcmp.eq.f32.partialorder %v3671, %v4336
  %vm4809 = vcmp.eq.f32.partialorder %v3672, %v4373
  %vm4810 = vcmp.eq.f32.partialorder %v3673, %v4410
  %vm4811 = vcmp.eq.f32.partialorder %v3674, %v4447
  %vm4812 = vcmp.eq.f32.partialorder %v3675, %v4484
  %vm4813 = vcmp.eq.f32.partialorder %v3676, %v4521
  %vm4814 = vcmp.eq.f32.partialorder %v3677, %v4558
  %vm4815 = vcmp.eq.f32.partialorder %v3678, %v4003
  %vm4816 = vcmp.eq.f32.partialorder %v3679, %v4040
  %vm4817 = vcmp.eq.f32.partialorder %v3680, %v4077
  %vm4818 = vcmp.eq.f32.partialorder %v3681, %v4114
  %vm4819 = vcmp.eq.f32.partialorder %v3682, %v4151
  %vm4820 = vcmp.eq.f32.partialorder %v3683, %v4188
  %vm4821 = vcmp.eq.f32.partialorder %v3684, %v4225
  %vm4822 = vcmp.eq.f32.partialorder %v3685, %v4262
  %vm4823 = vcmp.eq.f32.partialorder %v3686, %v4299
  %vm4824 = vcmp.eq.f32.partialorder %v3687, %v4336
  %vm4825 = vcmp.eq.f32.partialorder %v3688, %v4373
  %vm4826 = vcmp.eq.f32.partialorder %v3689, %v4410
  %vm4827 = vcmp.eq.f32.partialorder %v3690, %v4447
  %vm4828 = vcmp.eq.f32.partialorder %v3691, %v4484
  %vm4829 = vcmp.eq.f32.partialorder %v3692, %v4521
  %vm4830 = vcmp.eq.f32.partialorder %v3693, %v4558
  %vm4831 = vcmp.eq.f32.partialorder %v3694, %v4003
  %vm4832 = vcmp.eq.f32.partialorder %v3695, %v4040
  %vm4833 = vcmp.eq.f32.partialorder %v3696, %v4077
  %vm4834 = vcmp.eq.f32.partialorder %v3697, %v4114
  %vm4835 = vcmp.eq.f32.partialorder %v3698, %v4151
  %vm4836 = vcmp.eq.f32.partialorder %v3699, %v4188
  %vm4837 = vcmp.eq.f32.partialorder %v3700, %v4225
  %vm4838 = vcmp.eq.f32.partialorder %v3701, %v4262
  %vm4839 = vcmp.eq.f32.partialorder %v3702, %v4299
  %vm4840 = vcmp.eq.f32.partialorder %v3703, %v4336
  %vm4841 = vcmp.eq.f32.partialorder %v3704, %v4373
  %vm4842 = vcmp.eq.f32.partialorder %v3705, %v4410
  %vm4843 = vcmp.eq.f32.partialorder %v3706, %v4447
  %vm4844 = vcmp.eq.f32.partialorder %v3707, %v4484
  %vm4845 = vcmp.eq.f32.partialorder %v3708, %v4521
  %vm4846 = vcmp.eq.f32.partialorder %v3709, %v4558
  %vm4847 = vcmp.eq.f32.partialorder %v3710, %v4003
  %vm4848 = vcmp.eq.f32.partialorder %v3711, %v4040
  %vm4849 = vcmp.eq.f32.partialorder %v3712, %v4077
  %vm4850 = vcmp.eq.f32.partialorder %v3713, %v4114
  %vm4851 = vcmp.eq.f32.partialorder %v3714, %v4151
  %vm4852 = vcmp.eq.f32.partialorder %v3715, %v4188
  %vm4853 = vcmp.eq.f32.partialorder %v3716, %v4225
  %vm4854 = vcmp.eq.f32.partialorder %v3717, %v4262
  %vm4855 = vcmp.eq.f32.partialorder %v3718, %v4299
  %vm4856 = vcmp.eq.f32.partialorder %v3719, %v4336
  %vm4857 = vcmp.eq.f32.partialorder %v3720, %v4373
  %vm4858 = vcmp.eq.f32.partialorder %v3721, %v4410
  %vm4859 = vcmp.eq.f32.partialorder %v3722, %v4447
  %vm4860 = vcmp.eq.f32.partialorder %v3723, %v4484
  %vm4861 = vcmp.eq.f32.partialorder %v3724, %v4521
  %vm4862 = vcmp.eq.f32.partialorder %v3725, %v4558
  %vm4863 = vcmp.eq.f32.partialorder %v3726, %v4003
  %vm4864 = vcmp.eq.f32.partialorder %v3727, %v4040
  %vm4865 = vcmp.eq.f32.partialorder %v3728, %v4077
  %vm4866 = vcmp.eq.f32.partialorder %v3729, %v4114
  %vm4867 = vcmp.eq.f32.partialorder %v3730, %v4151
  %vm4868 = vcmp.eq.f32.partialorder %v3731, %v4188
  %vm4869 = vcmp.eq.f32.partialorder %v3732, %v4225
  %vm4870 = vcmp.eq.f32.partialorder %v3733, %v4262
  %vm4871 = vcmp.eq.f32.partialorder %v3734, %v4299
  %vm4872 = vcmp.eq.f32.partialorder %v3735, %v4336
  %vm4873 = vcmp.eq.f32.partialorder %v3736, %v4373
  %vm4874 = vcmp.eq.f32.partialorder %v3737, %v4410
  %vm4875 = vcmp.eq.f32.partialorder %v3738, %v4447
  %vm4876 = vcmp.eq.f32.partialorder %v3739, %v4484
  %vm4877 = vcmp.eq.f32.partialorder %v3740, %v4521
  %vm4878 = vcmp.eq.f32.partialorder %v3741, %v4558
  %vm4879 = vcmp.eq.f32.partialorder %v3742, %v4003
  %vm4880 = vcmp.eq.f32.partialorder %v3743, %v4040
  %vm4881 = vcmp.eq.f32.partialorder %v3744, %v4077
  %vm4882 = vcmp.eq.f32.partialorder %v3745, %v4114
  %vm4883 = vcmp.eq.f32.partialorder %v3746, %v4151
  %vm4884 = vcmp.eq.f32.partialorder %v3747, %v4188
  %vm4885 = vcmp.eq.f32.partialorder %v3748, %v4225
  %vm4886 = vcmp.eq.f32.partialorder %v3749, %v4262
  %vm4887 = vcmp.eq.f32.partialorder %v3750, %v4299
  %vm4888 = vcmp.eq.f32.partialorder %v3751, %v4336
  %vm4889 = vcmp.eq.f32.partialorder %v3752, %v4373
  %vm4890 = vcmp.eq.f32.partialorder %v3753, %v4410
  %vm4891 = vcmp.eq.f32.partialorder %v3754, %v4447
  %vm4892 = vcmp.eq.f32.partialorder %v3755, %v4484
  %vm4893 = vcmp.eq.f32.partialorder %v3756, %v4521
  %vm4894 = vcmp.eq.f32.partialorder %v3757, %v4558
  %vm4895 = vcmp.eq.f32.partialorder %v3758, %v4003
  %vm4896 = vcmp.eq.f32.partialorder %v3759, %v4040
  %vm4897 = vcmp.eq.f32.partialorder %v3760, %v4077
  %vm4898 = vcmp.eq.f32.partialorder %v3761, %v4114
  %vm4899 = vcmp.eq.f32.partialorder %v3762, %v4151
  %vm4900 = vcmp.eq.f32.partialorder %v3763, %v4188
  %vm4901 = vcmp.eq.f32.partialorder %v3764, %v4225
  %vm4902 = vcmp.eq.f32.partialorder %v3765, %v4262
  %vm4903 = vcmp.eq.f32.partialorder %v3766, %v4299
  %vm4904 = vcmp.eq.f32.partialorder %v3767, %v4336
  %vm4905 = vcmp.eq.f32.partialorder %v3768, %v4373
  %vm4906 = vcmp.eq.f32.partialorder %v3769, %v4410
  %vm4907 = vcmp.eq.f32.partialorder %v3770, %v4447
  %vm4908 = vcmp.eq.f32.partialorder %v3771, %v4484
  %vm4909 = vcmp.eq.f32.partialorder %v3772, %v4521
  %vm4910 = vcmp.eq.f32.partialorder %v3773, %v4558
  %vm4911 = vcmp.eq.f32.partialorder %v3774, %v4003
  %vm4912 = vcmp.eq.f32.partialorder %v3775, %v4040
  %vm4913 = vcmp.eq.f32.partialorder %v3776, %v4077
  %vm4914 = vcmp.eq.f32.partialorder %v3777, %v4114
  %vm4915 = vcmp.eq.f32.partialorder %v3778, %v4151
  %vm4916 = vcmp.eq.f32.partialorder %v3779, %v4188
  %vm4917 = vcmp.eq.f32.partialorder %v3780, %v4225
  %vm4918 = vcmp.eq.f32.partialorder %v3781, %v4262
  %vm4919 = vcmp.eq.f32.partialorder %v3782, %v4299
  %vm4920 = vcmp.eq.f32.partialorder %v3783, %v4336
  %vm4921 = vcmp.eq.f32.partialorder %v3784, %v4373
  %vm4922 = vcmp.eq.f32.partialorder %v3785, %v4410
  %vm4923 = vcmp.eq.f32.partialorder %v3786, %v4447
  %vm4924 = vcmp.eq.f32.partialorder %v3787, %v4484
  %vm4925 = vcmp.eq.f32.partialorder %v3788, %v4521
  %vm4926 = vcmp.eq.f32.partialorder %v3789, %v4558
  %vm4927 = vcmp.eq.f32.partialorder %v3790, %v4003
  %vm4928 = vcmp.eq.f32.partialorder %v3791, %v4040
  %vm4929 = vcmp.eq.f32.partialorder %v3792, %v4077
  %vm4930 = vcmp.eq.f32.partialorder %v3793, %v4114
  %vm4931 = vcmp.eq.f32.partialorder %v3794, %v4151
  %vm4932 = vcmp.eq.f32.partialorder %v3795, %v4188
  %vm4933 = vcmp.eq.f32.partialorder %v3796, %v4225
  %vm4934 = vcmp.eq.f32.partialorder %v3797, %v4262
  %vm4935 = vcmp.eq.f32.partialorder %v3798, %v4299
  %vm4936 = vcmp.eq.f32.partialorder %v3799, %v4336
  %vm4937 = vcmp.eq.f32.partialorder %v3800, %v4373
  %vm4938 = vcmp.eq.f32.partialorder %v3801, %v4410
  %vm4939 = vcmp.eq.f32.partialorder %v3802, %v4447
  %vm4940 = vcmp.eq.f32.partialorder %v3803, %v4484
  %vm4941 = vcmp.eq.f32.partialorder %v3804, %v4521
  %vm4942 = vcmp.eq.f32.partialorder %v3805, %v4558
  %vm4943 = vcmp.eq.f32.partialorder %v3806, %v4003
  %vm4944 = vcmp.eq.f32.partialorder %v3807, %v4040
  %vm4945 = vcmp.eq.f32.partialorder %v3808, %v4077
  %vm4946 = vcmp.eq.f32.partialorder %v3809, %v4114
  %vm4947 = vcmp.eq.f32.partialorder %v3810, %v4151
  %vm4948 = vcmp.eq.f32.partialorder %v3811, %v4188
  %vm4949 = vcmp.eq.f32.partialorder %v3812, %v4225
  %vm4950 = vcmp.eq.f32.partialorder %v3813, %v4262
  %vm4951 = vcmp.eq.f32.partialorder %v3814, %v4299
  %vm4952 = vcmp.eq.f32.partialorder %v3815, %v4336
  %vm4953 = vcmp.eq.f32.partialorder %v3816, %v4373
  %vm4954 = vcmp.eq.f32.partialorder %v3817, %v4410
  %vm4955 = vcmp.eq.f32.partialorder %v3818, %v4447
  %vm4956 = vcmp.eq.f32.partialorder %v3819, %v4484
  %vm4957 = vcmp.eq.f32.partialorder %v3820, %v4521
  %vm4958 = vcmp.eq.f32.partialorder %v3821, %v4558
  %vm4959 = vcmp.eq.f32.partialorder %v3822, %v4003
  %vm4960 = vcmp.eq.f32.partialorder %v3823, %v4040
  %vm4961 = vcmp.eq.f32.partialorder %v3824, %v4077
  %vm4962 = vcmp.eq.f32.partialorder %v3825, %v4114
  %vm4963 = vcmp.eq.f32.partialorder %v3826, %v4151
  %vm4964 = vcmp.eq.f32.partialorder %v3827, %v4188
  %vm4965 = vcmp.eq.f32.partialorder %v3828, %v4225
  %vm4966 = vcmp.eq.f32.partialorder %v3829, %v4262
  %vm4967 = vcmp.eq.f32.partialorder %v3830, %v4299
  %vm4968 = vcmp.eq.f32.partialorder %v3831, %v4336
  %vm4969 = vcmp.eq.f32.partialorder %v3832, %v4373
  %vm4970 = vcmp.eq.f32.partialorder %v3833, %v4410
  %vm4971 = vcmp.eq.f32.partialorder %v3834, %v4447
  %vm4972 = vcmp.eq.f32.partialorder %v3835, %v4484
  %vm4973 = vcmp.eq.f32.partialorder %v3836, %v4521
  %vm4974 = vcmp.eq.f32.partialorder %v3837, %v4558
  %vm4975 = vcmp.eq.f32.partialorder %v3838, %v4003
  %vm4976 = vcmp.eq.f32.partialorder %v3839, %v4040
  %vm4977 = vcmp.eq.f32.partialorder %v3840, %v4077
  %vm4978 = vcmp.eq.f32.partialorder %v3841, %v4114
  %vm4979 = vcmp.eq.f32.partialorder %v3842, %v4151
  %vm4980 = vcmp.eq.f32.partialorder %v3843, %v4188
  %vm4981 = vcmp.eq.f32.partialorder %v3844, %v4225
  %vm4982 = vcmp.eq.f32.partialorder %v3845, %v4262
  %vm4983 = vcmp.eq.f32.partialorder %v3846, %v4299
  %vm4984 = vcmp.eq.f32.partialorder %v3847, %v4336
  %vm4985 = vcmp.eq.f32.partialorder %v3848, %v4373
  %vm4986 = vcmp.eq.f32.partialorder %v3849, %v4410
  %vm4987 = vcmp.eq.f32.partialorder %v3850, %v4447
  %vm4988 = vcmp.eq.f32.partialorder %v3851, %v4484
  %vm4989 = vcmp.eq.f32.partialorder %v3852, %v4521
  %vm4990 = vcmp.eq.f32.partialorder %v3853, %v4558
  %vm4991 = vcmp.eq.f32.partialorder %v3854, %v4003
  %vm4992 = vcmp.eq.f32.partialorder %v3855, %v4040
  %vm4993 = vcmp.eq.f32.partialorder %v3856, %v4077
  %vm4994 = vcmp.eq.f32.partialorder %v3857, %v4114
  %vm4995 = vcmp.eq.f32.partialorder %v3858, %v4151
  %vm4996 = vcmp.eq.f32.partialorder %v3859, %v4188
  %vm4997 = vcmp.eq.f32.partialorder %v3860, %v4225
  %vm4998 = vcmp.eq.f32.partialorder %v3861, %v4262
  %vm4999 = vcmp.eq.f32.partialorder %v3862, %v4299
  %vm5000 = vcmp.eq.f32.partialorder %v3863, %v4336
  %vm5001 = vcmp.eq.f32.partialorder %v3864, %v4373
  %vm5002 = vcmp.eq.f32.partialorder %v3865, %v4410
  %vm5003 = vcmp.eq.f32.partialorder %v3866, %v4447
  %vm5004 = vcmp.eq.f32.partialorder %v3867, %v4484
  %vm5005 = vcmp.eq.f32.partialorder %v3868, %v4521
  %vm5006 = vcmp.eq.f32.partialorder %v3869, %v4558
  %vm5007 = vcmp.eq.f32.partialorder %v3870, %v4003
  %vm5008 = vcmp.eq.f32.partialorder %v3871, %v4040
  %vm5009 = vcmp.eq.f32.partialorder %v3872, %v4077
  %vm5010 = vcmp.eq.f32.partialorder %v3873, %v4114
  %vm5011 = vcmp.eq.f32.partialorder %v3874, %v4151
  %vm5012 = vcmp.eq.f32.partialorder %v3875, %v4188
  %vm5013 = vcmp.eq.f32.partialorder %v3876, %v4225
  %vm5014 = vcmp.eq.f32.partialorder %v3877, %v4262
  %vm5015 = vcmp.eq.f32.partialorder %v3878, %v4299
  %vm5016 = vcmp.eq.f32.partialorder %v3879, %v4336
  %vm5017 = vcmp.eq.f32.partialorder %v3880, %v4373
  %vm5018 = vcmp.eq.f32.partialorder %v3881, %v4410
  %vm5019 = vcmp.eq.f32.partialorder %v3882, %v4447
  %vm5020 = vcmp.eq.f32.partialorder %v3883, %v4484
  %vm5021 = vcmp.eq.f32.partialorder %v3884, %v4521
  %vm5022 = vcmp.eq.f32.partialorder %v3885, %v4558
  %vm5023 = vcmp.eq.f32.partialorder %v3886, %v4003
  %vm5024 = vcmp.eq.f32.partialorder %v3887, %v4040
  %vm5025 = vcmp.eq.f32.partialorder %v3888, %v4077
  %vm5026 = vcmp.eq.f32.partialorder %v3889, %v4114
  %vm5027 = vcmp.eq.f32.partialorder %v3890, %v4151
  %vm5028 = vcmp.eq.f32.partialorder %v3891, %v4188
  %vm5029 = vcmp.eq.f32.partialorder %v3892, %v4225
  %vm5030 = vcmp.eq.f32.partialorder %v3893, %v4262
  %vm5031 = vcmp.eq.f32.partialorder %v3894, %v4299
  %vm5032 = vcmp.eq.f32.partialorder %v3895, %v4336
  %vm5033 = vcmp.eq.f32.partialorder %v3896, %v4373
  %vm5034 = vcmp.eq.f32.partialorder %v3897, %v4410
  %vm5035 = vcmp.eq.f32.partialorder %v3898, %v4447
  %vm5036 = vcmp.eq.f32.partialorder %v3899, %v4484
  %vm5037 = vcmp.eq.f32.partialorder %v3900, %v4521
  %vm5038 = vcmp.eq.f32.partialorder %v3901, %v4558
  %vm5039 = vcmp.eq.f32.partialorder %v3902, %v4003
  %vm5040 = vcmp.eq.f32.partialorder %v3903, %v4040
  %vm5041 = vcmp.eq.f32.partialorder %v3904, %v4077
  %vm5042 = vcmp.eq.f32.partialorder %v3905, %v4114
  %vm5043 = vcmp.eq.f32.partialorder %v3906, %v4151
  %vm5044 = vcmp.eq.f32.partialorder %v3907, %v4188
  %vm5045 = vcmp.eq.f32.partialorder %v3908, %v4225
  %vm5046 = vcmp.eq.f32.partialorder %v3909, %v4262
  %vm5047 = vcmp.eq.f32.partialorder %v3910, %v4299
  %vm5048 = vcmp.eq.f32.partialorder %v3911, %v4336
  %vm5049 = vcmp.eq.f32.partialorder %v3912, %v4373
  %vm5050 = vcmp.eq.f32.partialorder %v3913, %v4410
  %vm5051 = vcmp.eq.f32.partialorder %v3914, %v4447
  %vm5052 = vcmp.eq.f32.partialorder %v3915, %v4484
  %vm5053 = vcmp.eq.f32.partialorder %v3916, %v4521
  %vm5054 = vcmp.eq.f32.partialorder %v3917, %v4558
  %vm5055 = vcmp.eq.f32.partialorder %v3918, %v4003
  %vm5056 = vcmp.eq.f32.partialorder %v3919, %v4040
  %vm5057 = vcmp.eq.f32.partialorder %v3920, %v4077
  %vm5058 = vcmp.eq.f32.partialorder %v3921, %v4114
  %vm5059 = vcmp.eq.f32.partialorder %v3922, %v4151
  %vm5060 = vcmp.eq.f32.partialorder %v3923, %v4188
  %vm5061 = vcmp.eq.f32.partialorder %v3924, %v4225
  %vm5062 = vcmp.eq.f32.partialorder %v3925, %v4262
  %vm5063 = vcmp.eq.f32.partialorder %v3926, %v4299
  %vm5064 = vcmp.eq.f32.partialorder %v3927, %v4336
  %vm5065 = vcmp.eq.f32.partialorder %v3928, %v4373
  %vm5066 = vcmp.eq.f32.partialorder %v3929, %v4410
  %vm5067 = vcmp.eq.f32.partialorder %v3930, %v4447
  %vm5068 = vcmp.eq.f32.partialorder %v3931, %v4484
  %vm5069 = vcmp.eq.f32.partialorder %v3932, %v4521
  %vm5070 = vcmp.eq.f32.partialorder %v3933, %v4558
  %v5071 = vsel %vm4559, %v3935, 256
  %v5072 = vsel %vm4560, %v3935, 256
  %v5073 = vsel %vm4561, %v3935, 256
  %v5074 = vsel %vm4562, %v3935, 256
  %v5075 = vsel %vm4563, %v3935, 256
  %v5076 = vsel %vm4564, %v3935, 256
  %v5077 = vsel %vm4565, %v3935, 256
  %v5078 = vsel %vm4566, %v3935, 256
  %v5079 = vsel %vm4567, %v3935, 256
  %v5080 = vsel %vm4568, %v3935, 256
  %v5081 = vsel %vm4569, %v3935, 256
  %v5082 = vsel %vm4570, %v3935, 256
  %v5083 = vsel %vm4571, %v3935, 256
  %v5084 = vsel %vm4572, %v3935, 256
  %v5085 = vsel %vm4573, %v3935, 256
  %v5086 = vsel %vm4574, %v3935, 256
  %v5087 = vsel %vm4575, %v3936, 256
  %v5088 = vsel %vm4576, %v3936, 256
  %v5089 = vsel %vm4577, %v3936, 256
  %v5090 = vsel %vm4578, %v3936, 256
  %v5091 = vsel %vm4579, %v3936, 256
  %v5092 = vsel %vm4580, %v3936, 256
  %v5093 = vsel %vm4581, %v3936, 256
  %v5094 = vsel %vm4582, %v3936, 256
  %v5095 = vsel %vm4583, %v3936, 256
  %v5096 = vsel %vm4584, %v3936, 256
  %v5097 = vsel %vm4585, %v3936, 256
  %v5098 = vsel %vm4586, %v3936, 256
  %v5099 = vsel %vm4587, %v3936, 256
  %v5100 = vsel %vm4588, %v3936, 256
  %v5101 = vsel %vm4589, %v3936, 256
  %v5102 = vsel %vm4590, %v3936, 256
  %v5103 = vsel %vm4591, %v3937, 256
  %v5104 = vsel %vm4592, %v3937, 256
  %v5105 = vsel %vm4593, %v3937, 256
  %v5106 = vsel %vm4594, %v3937, 256
  %v5107 = vsel %vm4595, %v3937, 256
  %v5108 = vsel %vm4596, %v3937, 256
  %v5109 = vsel %vm4597, %v3937, 256
  %v5110 = vsel %vm4598, %v3937, 256
  %v5111 = vsel %vm4599, %v3937, 256
  %v5112 = vsel %vm4600, %v3937, 256
  %v5113 = vsel %vm4601, %v3937, 256
  %v5114 = vsel %vm4602, %v3937, 256
  %v5115 = vsel %vm4603, %v3937, 256
  %v5116 = vsel %vm4604, %v3937, 256
  %v5117 = vsel %vm4605, %v3937, 256
  %v5118 = vsel %vm4606, %v3937, 256
  %v5119 = vsel %vm4607, %v3938, 256
  %v5120 = vsel %vm4608, %v3938, 256
  %v5121 = vsel %vm4609, %v3938, 256
  %v5122 = vsel %vm4610, %v3938, 256
  %v5123 = vsel %vm4611, %v3938, 256
  %v5124 = vsel %vm4612, %v3938, 256
  %v5125 = vsel %vm4613, %v3938, 256
  %v5126 = vsel %vm4614, %v3938, 256
  %v5127 = vsel %vm4615, %v3938, 256
  %v5128 = vsel %vm4616, %v3938, 256
  %v5129 = vsel %vm4617, %v3938, 256
  %v5130 = vsel %vm4618, %v3938, 256
  %v5131 = vsel %vm4619, %v3938, 256
  %v5132 = vsel %vm4620, %v3938, 256
  %v5133 = vsel %vm4621, %v3938, 256
  %v5134 = vsel %vm4622, %v3938, 256
  %v5135 = vsel %vm4623, %v3939, 256
  %v5136 = vsel %vm4624, %v3939, 256
  %v5137 = vsel %vm4625, %v3939, 256
  %v5138 = vsel %vm4626, %v3939, 256
  %v5139 = vsel %vm4627, %v3939, 256
  %v5140 = vsel %vm4628, %v3939, 256
  %v5141 = vsel %vm4629, %v3939, 256
  %v5142 = vsel %vm4630, %v3939, 256
  %v5143 = vsel %vm4631, %v3939, 256
  %v5144 = vsel %vm4632, %v3939, 256
  %v5145 = vsel %vm4633, %v3939, 256
  %v5146 = vsel %vm4634, %v3939, 256
  %v5147 = vsel %vm4635, %v3939, 256
  %v5148 = vsel %vm4636, %v3939, 256
  %v5149 = vsel %vm4637, %v3939, 256
  %v5150 = vsel %vm4638, %v3939, 256
  %v5151 = vsel %vm4639, %v3940, 256
  %v5152 = vsel %vm4640, %v3940, 256
  %v5153 = vsel %vm4641, %v3940, 256
  %v5154 = vsel %vm4642, %v3940, 256
  %v5155 = vsel %vm4643, %v3940, 256
  %v5156 = vsel %vm4644, %v3940, 256
  %v5157 = vsel %vm4645, %v3940, 256
  %v5158 = vsel %vm4646, %v3940, 256
  %v5159 = vsel %vm4647, %v3940, 256
  %v5160 = vsel %vm4648, %v3940, 256
  %v5161 = vsel %vm4649, %v3940, 256
  %v5162 = vsel %vm4650, %v3940, 256
  %v5163 = vsel %vm4651, %v3940, 256
  %v5164 = vsel %vm4652, %v3940, 256
  %v5165 = vsel %vm4653, %v3940, 256
  %v5166 = vsel %vm4654, %v3940, 256
  %v5167 = vsel %vm4655, %v3941, 256
  %v5168 = vsel %vm4656, %v3941, 256
  %v5169 = vsel %vm4657, %v3941, 256
  %v5170 = vsel %vm4658, %v3941, 256
  %v5171 = vsel %vm4659, %v3941, 256
  %v5172 = vsel %vm4660, %v3941, 256
  %v5173 = vsel %vm4661, %v3941, 256
  %v5174 = vsel %vm4662, %v3941, 256
  %v5175 = vsel %vm4663, %v3941, 256
  %v5176 = vsel %vm4664, %v3941, 256
  %v5177 = vsel %vm4665, %v3941, 256
  %v5178 = vsel %vm4666, %v3941, 256
  %v5179 = vsel %vm4667, %v3941, 256
  %v5180 = vsel %vm4668, %v3941, 256
  %v5181 = vsel %vm4669, %v3941, 256
  %v5182 = vsel %vm4670, %v3941, 256
  %v5183 = vsel %vm4671, %v3942, 256
  %v5184 = vsel %vm4672, %v3942, 256
  %v5185 = vsel %vm4673, %v3942, 256
  %v5186 = vsel %vm4674, %v3942, 256
  %v5187 = vsel %vm4675, %v3942, 256
  %v5188 = vsel %vm4676, %v3942, 256
  %v5189 = vsel %vm4677, %v3942, 256
  %v5190 = vsel %vm4678, %v3942, 256
  %v5191 = vsel %vm4679, %v3942, 256
  %v5192 = vsel %vm4680, %v3942, 256
  %v5193 = vsel %vm4681, %v3942, 256
  %v5194 = vsel %vm4682, %v3942, 256
  %v5195 = vsel %vm4683, %v3942, 256
  %v5196 = vsel %vm4684, %v3942, 256
  %v5197 = vsel %vm4685, %v3942, 256
  %v5198 = vsel %vm4686, %v3942, 256
  %v5199 = vsel %vm4687, %v3943, 256
  %v5200 = vsel %vm4688, %v3943, 256
  %v5201 = vsel %vm4689, %v3943, 256
  %v5202 = vsel %vm4690, %v3943, 256
  %v5203 = vsel %vm4691, %v3943, 256
  %v5204 = vsel %vm4692, %v3943, 256
  %v5205 = vsel %vm4693, %v3943, 256
  %v5206 = vsel %vm4694, %v3943, 256
  %v5207 = vsel %vm4695, %v3943, 256
  %v5208 = vsel %vm4696, %v3943, 256
  %v5209 = vsel %vm4697, %v3943, 256
  %v5210 = vsel %vm4698, %v3943, 256
  %v5211 = vsel %vm4699, %v3943, 256
  %v5212 = vsel %vm4700, %v3943, 256
  %v5213 = vsel %vm4701, %v3943, 256
  %v5214 = vsel %vm4702, %v3943, 256
  %v5215 = vsel %vm4703, %v3944, 256
  %v5216 = vsel %vm4704, %v3944, 256
  %v5217 = vsel %vm4705, %v3944, 256
  %v5218 = vsel %vm4706, %v3944, 256
  %v5219 = vsel %vm4707, %v3944, 256
  %v5220 = vsel %vm4708, %v3944, 256
  %v5221 = vsel %vm4709, %v3944, 256
  %v5222 = vsel %vm4710, %v3944, 256
  %v5223 = vsel %vm4711, %v3944, 256
  %v5224 = vsel %vm4712, %v3944, 256
  %v5225 = vsel %vm4713, %v3944, 256
  %v5226 = vsel %vm4714, %v3944, 256
  %v5227 = vsel %vm4715, %v3944, 256
  %v5228 = vsel %vm4716, %v3944, 256
  %v5229 = vsel %vm4717, %v3944, 256
  %v5230 = vsel %vm4718, %v3944, 256
  %v5231 = vsel %vm4719, %v3945, 256
  %v5232 = vsel %vm4720, %v3945, 256
  %v5233 = vsel %vm4721, %v3945, 256
  %v5234 = vsel %vm4722, %v3945, 256
  %v5235 = vsel %vm4723, %v3945, 256
  %v5236 = vsel %vm4724, %v3945, 256
  %v5237 = vsel %vm4725, %v3945, 256
  %v5238 = vsel %vm4726, %v3945, 256
  %v5239 = vsel %vm4727, %v3945, 256
  %v5240 = vsel %vm4728, %v3945, 256
  %v5241 = vsel %vm4729, %v3945, 256
  %v5242 = vsel %vm4730, %v3945, 256
  %v5243 = vsel %vm4731, %v3945, 256
  %v5244 = vsel %vm4732, %v3945, 256
  %v5245 = vsel %vm4733, %v3945, 256
  %v5246 = vsel %vm4734, %v3945, 256
  %v5247 = vsel %vm4735, %v3946, 256
  %v5248 = vsel %vm4736, %v3946, 256
  %v5249 = vsel %vm4737, %v3946, 256
  %v5250 = vsel %vm4738, %v3946, 256
  %v5251 = vsel %vm4739, %v3946, 256
  %v5252 = vsel %vm4740, %v3946, 256
  %v5253 = vsel %vm4741, %v3946, 256
  %v5254 = vsel %vm4742, %v3946, 256
  %v5255 = vsel %vm4743, %v3946, 256
  %v5256 = vsel %vm4744, %v3946, 256
  %v5257 = vsel %vm4745, %v3946, 256
  %v5258 = vsel %vm4746, %v3946, 256
  %v5259 = vsel %vm4747, %v3946, 256
  %v5260 = vsel %vm4748, %v3946, 256
  %v5261 = vsel %vm4749, %v3946, 256
  %v5262 = vsel %vm4750, %v3946, 256
  %v5263 = vsel %vm4751, %v3947, 256
  %v5264 = vsel %vm4752, %v3947, 256
  %v5265 = vsel %vm4753, %v3947, 256
  %v5266 = vsel %vm4754, %v3947, 256
  %v5267 = vsel %vm4755, %v3947, 256
  %v5268 = vsel %vm4756, %v3947, 256
  %v5269 = vsel %vm4757, %v3947, 256
  %v5270 = vsel %vm4758, %v3947, 256
  %v5271 = vsel %vm4759, %v3947, 256
  %v5272 = vsel %vm4760, %v3947, 256
  %v5273 = vsel %vm4761, %v3947, 256
  %v5274 = vsel %vm4762, %v3947, 256
  %v5275 = vsel %vm4763, %v3947, 256
  %v5276 = vsel %vm4764, %v3947, 256
  %v5277 = vsel %vm4765, %v3947, 256
  %v5278 = vsel %vm4766, %v3947, 256
  %v5279 = vsel %vm4767, %v3948, 256
  %v5280 = vsel %vm4768, %v3948, 256
  %v5281 = vsel %vm4769, %v3948, 256
  %v5282 = vsel %vm4770, %v3948, 256
  %v5283 = vsel %vm4771, %v3948, 256
  %v5284 = vsel %vm4772, %v3948, 256
  %v5285 = vsel %vm4773, %v3948, 256
  %v5286 = vsel %vm4774, %v3948, 256
  %v5287 = vsel %vm4775, %v3948, 256
  %v5288 = vsel %vm4776, %v3948, 256
  %v5289 = vsel %vm4777, %v3948, 256
  %v5290 = vsel %vm4778, %v3948, 256
  %v5291 = vsel %vm4779, %v3948, 256
  %v5292 = vsel %vm4780, %v3948, 256
  %v5293 = vsel %vm4781, %v3948, 256
  %v5294 = vsel %vm4782, %v3948, 256
  %v5295 = vsel %vm4783, %v3949, 256
  %v5296 = vsel %vm4784, %v3949, 256
  %v5297 = vsel %vm4785, %v3949, 256
  %v5298 = vsel %vm4786, %v3949, 256
  %v5299 = vsel %vm4787, %v3949, 256
  %v5300 = vsel %vm4788, %v3949, 256
  %v5301 = vsel %vm4789, %v3949, 256
  %v5302 = vsel %vm4790, %v3949, 256
  %v5303 = vsel %vm4791, %v3949, 256
  %v5304 = vsel %vm4792, %v3949, 256
  %v5305 = vsel %vm4793, %v3949, 256
  %v5306 = vsel %vm4794, %v3949, 256
  %v5307 = vsel %vm4795, %v3949, 256
  %v5308 = vsel %vm4796, %v3949, 256
  %v5309 = vsel %vm4797, %v3949, 256
  %v5310 = vsel %vm4798, %v3949, 256
  %v5311 = vsel %vm4799, %v3950, 256
  %v5312 = vsel %vm4800, %v3950, 256
  %v5313 = vsel %vm4801, %v3950, 256
  %v5314 = vsel %vm4802, %v3950, 256
  %v5315 = vsel %vm4803, %v3950, 256
  %v5316 = vsel %vm4804, %v3950, 256
  %v5317 = vsel %vm4805, %v3950, 256
  %v5318 = vsel %vm4806, %v3950, 256
  %v5319 = vsel %vm4807, %v3950, 256
  %v5320 = vsel %vm4808, %v3950, 256
  %v5321 = vsel %vm4809, %v3950, 256
  %v5322 = vsel %vm4810, %v3950, 256
  %v5323 = vsel %vm4811, %v3950, 256
  %v5324 = vsel %vm4812, %v3950, 256
  %v5325 = vsel %vm4813, %v3950, 256
  %v5326 = vsel %vm4814, %v3950, 256
  %v5327 = vsel %vm4815, %v3951, 256
  %v5328 = vsel %vm4816, %v3951, 256
  %v5329 = vsel %vm4817, %v3951, 256
  %v5330 = vsel %vm4818, %v3951, 256
  %v5331 = vsel %vm4819, %v3951, 256
  %v5332 = vsel %vm4820, %v3951, 256
  %v5333 = vsel %vm4821, %v3951, 256
  %v5334 = vsel %vm4822, %v3951, 256
  %v5335 = vsel %vm4823, %v3951, 256
  %v5336 = vsel %vm4824, %v3951, 256
  %v5337 = vsel %vm4825, %v3951, 256
  %v5338 = vsel %vm4826, %v3951, 256
  %v5339 = vsel %vm4827, %v3951, 256
  %v5340 = vsel %vm4828, %v3951, 256
  %v5341 = vsel %vm4829, %v3951, 256
  %v5342 = vsel %vm4830, %v3951, 256
  %v5343 = vsel %vm4831, %v3952, 256
  %v5344 = vsel %vm4832, %v3952, 256
  %v5345 = vsel %vm4833, %v3952, 256
  %v5346 = vsel %vm4834, %v3952, 256
  %v5347 = vsel %vm4835, %v3952, 256
  %v5348 = vsel %vm4836, %v3952, 256
  %v5349 = vsel %vm4837, %v3952, 256
  %v5350 = vsel %vm4838, %v3952, 256
  %v5351 = vsel %vm4839, %v3952, 256
  %v5352 = vsel %vm4840, %v3952, 256
  %v5353 = vsel %vm4841, %v3952, 256
  %v5354 = vsel %vm4842, %v3952, 256
  %v5355 = vsel %vm4843, %v3952, 256
  %v5356 = vsel %vm4844, %v3952, 256
  %v5357 = vsel %vm4845, %v3952, 256
  %v5358 = vsel %vm4846, %v3952, 256
  %v5359 = vsel %vm4847, %v3953, 256
  %v5360 = vsel %vm4848, %v3953, 256
  %v5361 = vsel %vm4849, %v3953, 256
  %v5362 = vsel %vm4850, %v3953, 256
  %v5363 = vsel %vm4851, %v3953, 256
  %v5364 = vsel %vm4852, %v3953, 256
  %v5365 = vsel %vm4853, %v3953, 256
  %v5366 = vsel %vm4854, %v3953, 256
  %v5367 = vsel %vm4855, %v3953, 256
  %v5368 = vsel %vm4856, %v3953, 256
  %v5369 = vsel %vm4857, %v3953, 256
  %v5370 = vsel %vm4858, %v3953, 256
  %v5371 = vsel %vm4859, %v3953, 256
  %v5372 = vsel %vm4860, %v3953, 256
  %v5373 = vsel %vm4861, %v3953, 256
  %v5374 = vsel %vm4862, %v3953, 256
  %v5375 = vsel %vm4863, %v3954, 256
  %v5376 = vsel %vm4864, %v3954, 256
  %v5377 = vsel %vm4865, %v3954, 256
  %v5378 = vsel %vm4866, %v3954, 256
  %v5379 = vsel %vm4867, %v3954, 256
  %v5380 = vsel %vm4868, %v3954, 256
  %v5381 = vsel %vm4869, %v3954, 256
  %v5382 = vsel %vm4870, %v3954, 256
  %v5383 = vsel %vm4871, %v3954, 256
  %v5384 = vsel %vm4872, %v3954, 256
  %v5385 = vsel %vm4873, %v3954, 256
  %v5386 = vsel %vm4874, %v3954, 256
  %v5387 = vsel %vm4875, %v3954, 256
  %v5388 = vsel %vm4876, %v3954, 256
  %v5389 = vsel %vm4877, %v3954, 256
  %v5390 = vsel %vm4878, %v3954, 256
  %v5391 = vsel %vm4879, %v3955, 256
  %v5392 = vsel %vm4880, %v3955, 256
  %v5393 = vsel %vm4881, %v3955, 256
  %v5394 = vsel %vm4882, %v3955, 256
  %v5395 = vsel %vm4883, %v3955, 256
  %v5396 = vsel %vm4884, %v3955, 256
  %v5397 = vsel %vm4885, %v3955, 256
  %v5398 = vsel %vm4886, %v3955, 256
  %v5399 = vsel %vm4887, %v3955, 256
  %v5400 = vsel %vm4888, %v3955, 256
  %v5401 = vsel %vm4889, %v3955, 256
  %v5402 = vsel %vm4890, %v3955, 256
  %v5403 = vsel %vm4891, %v3955, 256
  %v5404 = vsel %vm4892, %v3955, 256
  %v5405 = vsel %vm4893, %v3955, 256
  %v5406 = vsel %vm4894, %v3955, 256
  %v5407 = vsel %vm4895, %v3956, 256
  %v5408 = vsel %vm4896, %v3956, 256
  %v5409 = vsel %vm4897, %v3956, 256
  %v5410 = vsel %vm4898, %v3956, 256
  %v5411 = vsel %vm4899, %v3956, 256
  %v5412 = vsel %vm4900, %v3956, 256
  %v5413 = vsel %vm4901, %v3956, 256
  %v5414 = vsel %vm4902, %v3956, 256
  %v5415 = vsel %vm4903, %v3956, 256
  %v5416 = vsel %vm4904, %v3956, 256
  %v5417 = vsel %vm4905, %v3956, 256
  %v5418 = vsel %vm4906, %v3956, 256
  %v5419 = vsel %vm4907, %v3956, 256
  %v5420 = vsel %vm4908, %v3956, 256
  %v5421 = vsel %vm4909, %v3956, 256
  %v5422 = vsel %vm4910, %v3956, 256
  %v5423 = vsel %vm4911, %v3957, 256
  %v5424 = vsel %vm4912, %v3957, 256
  %v5425 = vsel %vm4913, %v3957, 256
  %v5426 = vsel %vm4914, %v3957, 256
  %v5427 = vsel %vm4915, %v3957, 256
  %v5428 = vsel %vm4916, %v3957, 256
  %v5429 = vsel %vm4917, %v3957, 256
  %v5430 = vsel %vm4918, %v3957, 256
  %v5431 = vsel %vm4919, %v3957, 256
  %v5432 = vsel %vm4920, %v3957, 256
  %v5433 = vsel %vm4921, %v3957, 256
  %v5434 = vsel %vm4922, %v3957, 256
  %v5435 = vsel %vm4923, %v3957, 256
  %v5436 = vsel %vm4924, %v3957, 256
  %v5437 = vsel %vm4925, %v3957, 256
  %v5438 = vsel %vm4926, %v3957, 256
  %v5439 = vsel %vm4927, %v3958, 256
  %v5440 = vsel %vm4928, %v3958, 256
  %v5441 = vsel %vm4929, %v3958, 256
  %v5442 = vsel %vm4930, %v3958, 256
  %v5443 = vsel %vm4931, %v3958, 256
  %v5444 = vsel %vm4932, %v3958, 256
  %v5445 = vsel %vm4933, %v3958, 256
  %v5446 = vsel %vm4934, %v3958, 256
  %v5447 = vsel %vm4935, %v3958, 256
  %v5448 = vsel %vm4936, %v3958, 256
  %v5449 = vsel %vm4937, %v3958, 256
  %v5450 = vsel %vm4938, %v3958, 256
  %v5451 = vsel %vm4939, %v3958, 256
  %v5452 = vsel %vm4940, %v3958, 256
  %v5453 = vsel %vm4941, %v3958, 256
  %v5454 = vsel %vm4942, %v3958, 256
  %v5455 = vsel %vm4943, %v3959, 256
  %v5456 = vsel %vm4944, %v3959, 256
  %v5457 = vsel %vm4945, %v3959, 256
  %v5458 = vsel %vm4946, %v3959, 256
  %v5459 = vsel %vm4947, %v3959, 256
  %v5460 = vsel %vm4948, %v3959, 256
  %v5461 = vsel %vm4949, %v3959, 256
  %v5462 = vsel %vm4950, %v3959, 256
  %v5463 = vsel %vm4951, %v3959, 256
  %v5464 = vsel %vm4952, %v3959, 256
  %v5465 = vsel %vm4953, %v3959, 256
  %v5466 = vsel %vm4954, %v3959, 256
  %v5467 = vsel %vm4955, %v3959, 256
  %v5468 = vsel %vm4956, %v3959, 256
  %v5469 = vsel %vm4957, %v3959, 256
  %v5470 = vsel %vm4958, %v3959, 256
  %v5471 = vsel %vm4959, %v3960, 256
  %v5472 = vsel %vm4960, %v3960, 256
  %v5473 = vsel %vm4961, %v3960, 256
  %v5474 = vsel %vm4962, %v3960, 256
  %v5475 = vsel %vm4963, %v3960, 256
  %v5476 = vsel %vm4964, %v3960, 256
  %v5477 = vsel %vm4965, %v3960, 256
  %v5478 = vsel %vm4966, %v3960, 256
  %v5479 = vsel %vm4967, %v3960, 256
  %v5480 = vsel %vm4968, %v3960, 256
  %v5481 = vsel %vm4969, %v3960, 256
  %v5482 = vsel %vm4970, %v3960, 256
  %v5483 = vsel %vm4971, %v3960, 256
  %v5484 = vsel %vm4972, %v3960, 256
  %v5485 = vsel %vm4973, %v3960, 256
  %v5486 = vsel %vm4974, %v3960, 256
  %v5487 = vsel %vm4975, %v3961, 256
  %v5488 = vsel %vm4976, %v3961, 256
  %v5489 = vsel %vm4977, %v3961, 256
  %v5490 = vsel %vm4978, %v3961, 256
  %v5491 = vsel %vm4979, %v3961, 256
  %v5492 = vsel %vm4980, %v3961, 256
  %v5493 = vsel %vm4981, %v3961, 256
  %v5494 = vsel %vm4982, %v3961, 256
  %v5495 = vsel %vm4983, %v3961, 256
  %v5496 = vsel %vm4984, %v3961, 256
  %v5497 = vsel %vm4985, %v3961, 256
  %v5498 = vsel %vm4986, %v3961, 256
  %v5499 = vsel %vm4987, %v3961, 256
  %v5500 = vsel %vm4988, %v3961, 256
  %v5501 = vsel %vm4989, %v3961, 256
  %v5502 = vsel %vm4990, %v3961, 256
  %v5503 = vsel %vm4991, %v3962, 256
  %v5504 = vsel %vm4992, %v3962, 256
  %v5505 = vsel %vm4993, %v3962, 256
  %v5506 = vsel %vm4994, %v3962, 256
  %v5507 = vsel %vm4995, %v3962, 256
  %v5508 = vsel %vm4996, %v3962, 256
  %v5509 = vsel %vm4997, %v3962, 256
  %v5510 = vsel %vm4998, %v3962, 256
  %v5511 = vsel %vm4999, %v3962, 256
  %v5512 = vsel %vm5000, %v3962, 256
  %v5513 = vsel %vm5001, %v3962, 256
  %v5514 = vsel %vm5002, %v3962, 256
  %v5515 = vsel %vm5003, %v3962, 256
  %v5516 = vsel %vm5004, %v3962, 256
  %v5517 = vsel %vm5005, %v3962, 256
  %v5518 = vsel %vm5006, %v3962, 256
  %v5519 = vsel %vm5007, %v3963, 256
  %v5520 = vsel %vm5008, %v3963, 256
  %v5521 = vsel %vm5009, %v3963, 256
  %v5522 = vsel %vm5010, %v3963, 256
  %v5523 = vsel %vm5011, %v3963, 256
  %v5524 = vsel %vm5012, %v3963, 256
  %v5525 = vsel %vm5013, %v3963, 256
  %v5526 = vsel %vm5014, %v3963, 256
  %v5527 = vsel %vm5015, %v3963, 256
  %v5528 = vsel %vm5016, %v3963, 256
  %v5529 = vsel %vm5017, %v3963, 256
  %v5530 = vsel %vm5018, %v3963, 256
  %v5531 = vsel %vm5019, %v3963, 256
  %v5532 = vsel %vm5020, %v3963, 256
  %v5533 = vsel %vm5021, %v3963, 256
  %v5534 = vsel %vm5022, %v3963, 256
  %v5535 = vsel %vm5023, %v3964, 256
  %v5536 = vsel %vm5024, %v3964, 256
  %v5537 = vsel %vm5025, %v3964, 256
  %v5538 = vsel %vm5026, %v3964, 256
  %v5539 = vsel %vm5027, %v3964, 256
  %v5540 = vsel %vm5028, %v3964, 256
  %v5541 = vsel %vm5029, %v3964, 256
  %v5542 = vsel %vm5030, %v3964, 256
  %v5543 = vsel %vm5031, %v3964, 256
  %v5544 = vsel %vm5032, %v3964, 256
  %v5545 = vsel %vm5033, %v3964, 256
  %v5546 = vsel %vm5034, %v3964, 256
  %v5547 = vsel %vm5035, %v3964, 256
  %v5548 = vsel %vm5036, %v3964, 256
  %v5549 = vsel %vm5037, %v3964, 256
  %v5550 = vsel %vm5038, %v3964, 256
  %v5551 = vsel %vm5039, %v3965, 256
  %v5552 = vsel %vm5040, %v3965, 256
  %v5553 = vsel %vm5041, %v3965, 256
  %v5554 = vsel %vm5042, %v3965, 256
  %v5555 = vsel %vm5043, %v3965, 256
  %v5556 = vsel %vm5044, %v3965, 256
  %v5557 = vsel %vm5045, %v3965, 256
  %v5558 = vsel %vm5046, %v3965, 256
  %v5559 = vsel %vm5047, %v3965, 256
  %v5560 = vsel %vm5048, %v3965, 256
  %v5561 = vsel %vm5049, %v3965, 256
  %v5562 = vsel %vm5050, %v3965, 256
  %v5563 = vsel %vm5051, %v3965, 256
  %v5564 = vsel %vm5052, %v3965, 256
  %v5565 = vsel %vm5053, %v3965, 256
  %v5566 = vsel %vm5054, %v3965, 256
  %v5567 = vsel %vm5055, %v3966, 256
  %v5568 = vsel %vm5056, %v3966, 256
  %v5569 = vsel %vm5057, %v3966, 256
  %v5570 = vsel %vm5058, %v3966, 256
  %v5571 = vsel %vm5059, %v3966, 256
  %v5572 = vsel %vm5060, %v3966, 256
  %v5573 = vsel %vm5061, %v3966, 256
  %v5574 = vsel %vm5062, %v3966, 256
  %v5575 = vsel %vm5063, %v3966, 256
  %v5576 = vsel %vm5064, %v3966, 256
  %v5577 = vsel %vm5065, %v3966, 256
  %v5578 = vsel %vm5066, %v3966, 256
  %v5579 = vsel %vm5067, %v3966, 256
  %v5580 = vsel %vm5068, %v3966, 256
  %v5581 = vsel %vm5069, %v3966, 256
  %v5582 = vsel %vm5070, %v3966, 256
  %vm5583 = vcmp.lt.s32.totalorder %v5071, %v5087
  %v5584 = vsel %vm5583, %v5071, %v5087
  %vm5585 = vcmp.lt.s32.totalorder %v5584, %v5103
  %v5586 = vsel %vm5585, %v5584, %v5103
  %vm5587 = vcmp.lt.s32.totalorder %v5586, %v5119
  %v5588 = vsel %vm5587, %v5586, %v5119
  %vm5589 = vcmp.lt.s32.totalorder %v5588, %v5135
  %v5590 = vsel %vm5589, %v5588, %v5135
  %vm5591 = vcmp.lt.s32.totalorder %v5590, %v5151
  %v5592 = vsel %vm5591, %v5590, %v5151
  %vm5593 = vcmp.lt.s32.totalorder %v5592, %v5167
  %v5594 = vsel %vm5593, %v5592, %v5167
  %vm5595 = vcmp.lt.s32.totalorder %v5594, %v5183
  %v5596 = vsel %vm5595, %v5594, %v5183
  %vm5597 = vcmp.lt.s32.totalorder %v5596, %v5199
  %v5598 = vsel %vm5597, %v5596, %v5199
  %vm5599 = vcmp.lt.s32.totalorder %v5598, %v5215
  %v5600 = vsel %vm5599, %v5598, %v5215
  %vm5601 = vcmp.lt.s32.totalorder %v5600, %v5231
  %v5602 = vsel %vm5601, %v5600, %v5231
  %vm5603 = vcmp.lt.s32.totalorder %v5602, %v5247
  %v5604 = vsel %vm5603, %v5602, %v5247
  %vm5605 = vcmp.lt.s32.totalorder %v5604, %v5263
  %v5606 = vsel %vm5605, %v5604, %v5263
  %vm5607 = vcmp.lt.s32.totalorder %v5606, %v5279
  %v5608 = vsel %vm5607, %v5606, %v5279
  %vm5609 = vcmp.lt.s32.totalorder %v5608, %v5295
  %v5610 = vsel %vm5609, %v5608, %v5295
  %vm5611 = vcmp.lt.s32.totalorder %v5610, %v5311
  %v5612 = vsel %vm5611, %v5610, %v5311
  %vm5613 = vcmp.lt.s32.totalorder %v5612, %v5327
  %v5614 = vsel %vm5613, %v5612, %v5327
  %vm5615 = vcmp.lt.s32.totalorder %v5614, %v5343
  %v5616 = vsel %vm5615, %v5614, %v5343
  %vm5617 = vcmp.lt.s32.totalorder %v5616, %v5359
  %v5618 = vsel %vm5617, %v5616, %v5359
  %vm5619 = vcmp.lt.s32.totalorder %v5618, %v5375
  %v5620 = vsel %vm5619, %v5618, %v5375
  %vm5621 = vcmp.lt.s32.totalorder %v5620, %v5391
  %v5622 = vsel %vm5621, %v5620, %v5391
  %vm5623 = vcmp.lt.s32.totalorder %v5622, %v5407
  %v5624 = vsel %vm5623, %v5622, %v5407
  %vm5625 = vcmp.lt.s32.totalorder %v5624, %v5423
  %v5626 = vsel %vm5625, %v5624, %v5423
  %vm5627 = vcmp.lt.s32.totalorder %v5626, %v5439
  %v5628 = vsel %vm5627, %v5626, %v5439
  %vm5629 = vcmp.lt.s32.totalorder %v5628, %v5455
  %v5630 = vsel %vm5629, %v5628, %v5455
  %vm5631 = vcmp.lt.s32.totalorder %v5630, %v5471
  %v5632 = vsel %vm5631, %v5630, %v5471
  %vm5633 = vcmp.lt.s32.totalorder %v5632, %v5487
  %v5634 = vsel %vm5633, %v5632, %v5487
  %vm5635 = vcmp.lt.s32.totalorder %v5634, %v5503
  %v5636 = vsel %vm5635, %v5634, %v5503
  %vm5637 = vcmp.lt.s32.totalorder %v5636, %v5519
  %v5638 = vsel %vm5637, %v5636, %v5519
  %vm5639 = vcmp.lt.s32.totalorder %v5638, %v5535
  %v5640 = vsel %vm5639, %v5638, %v5535
  %vm5641 = vcmp.lt.s32.totalorder %v5640, %v5551
  %v5642 = vsel %vm5641, %v5640, %v5551
  %vm5643 = vcmp.lt.s32.totalorder %v5642, %v5567
  %v5644 = vsel %vm5643, %v5642, %v5567
  %v5645 = vrot.slane %v5644, 4
  %vm5646 = vcmp.lt.s32.totalorder %v5644, %v5645
  %v5647 = vsel %vm5646, %v5644, %v5645
  %v5648 = vrot.slane %v5647, 2
  %vm5649 = vcmp.lt.s32.totalorder %v5647, %v5648
  %v5650 = vsel %vm5649, %v5647, %v5648
  %v5651 = vrot.slane %v5650, 1
  %vm5652 = vcmp.lt.s32.totalorder %v5650, %v5651
  %v5653 = vsel %vm5652, %v5650, %v5651
  %vm5654 = vcmp.lt.s32.totalorder %v5072, %v5088
  %v5655 = vsel %vm5654, %v5072, %v5088
  %vm5656 = vcmp.lt.s32.totalorder %v5655, %v5104
  %v5657 = vsel %vm5656, %v5655, %v5104
  %vm5658 = vcmp.lt.s32.totalorder %v5657, %v5120
  %v5659 = vsel %vm5658, %v5657, %v5120
  %vm5660 = vcmp.lt.s32.totalorder %v5659, %v5136
  %v5661 = vsel %vm5660, %v5659, %v5136
  %vm5662 = vcmp.lt.s32.totalorder %v5661, %v5152
  %v5663 = vsel %vm5662, %v5661, %v5152
  %vm5664 = vcmp.lt.s32.totalorder %v5663, %v5168
  %v5665 = vsel %vm5664, %v5663, %v5168
  %vm5666 = vcmp.lt.s32.totalorder %v5665, %v5184
  %v5667 = vsel %vm5666, %v5665, %v5184
  %vm5668 = vcmp.lt.s32.totalorder %v5667, %v5200
  %v5669 = vsel %vm5668, %v5667, %v5200
  %vm5670 = vcmp.lt.s32.totalorder %v5669, %v5216
  %v5671 = vsel %vm5670, %v5669, %v5216
  %vm5672 = vcmp.lt.s32.totalorder %v5671, %v5232
  %v5673 = vsel %vm5672, %v5671, %v5232
  %vm5674 = vcmp.lt.s32.totalorder %v5673, %v5248
  %v5675 = vsel %vm5674, %v5673, %v5248
  %vm5676 = vcmp.lt.s32.totalorder %v5675, %v5264
  %v5677 = vsel %vm5676, %v5675, %v5264
  %vm5678 = vcmp.lt.s32.totalorder %v5677, %v5280
  %v5679 = vsel %vm5678, %v5677, %v5280
  %vm5680 = vcmp.lt.s32.totalorder %v5679, %v5296
  %v5681 = vsel %vm5680, %v5679, %v5296
  %vm5682 = vcmp.lt.s32.totalorder %v5681, %v5312
  %v5683 = vsel %vm5682, %v5681, %v5312
  %vm5684 = vcmp.lt.s32.totalorder %v5683, %v5328
  %v5685 = vsel %vm5684, %v5683, %v5328
  %vm5686 = vcmp.lt.s32.totalorder %v5685, %v5344
  %v5687 = vsel %vm5686, %v5685, %v5344
  %vm5688 = vcmp.lt.s32.totalorder %v5687, %v5360
  %v5689 = vsel %vm5688, %v5687, %v5360
  %vm5690 = vcmp.lt.s32.totalorder %v5689, %v5376
  %v5691 = vsel %vm5690, %v5689, %v5376
  %vm5692 = vcmp.lt.s32.totalorder %v5691, %v5392
  %v5693 = vsel %vm5692, %v5691, %v5392
  %vm5694 = vcmp.lt.s32.totalorder %v5693, %v5408
  %v5695 = vsel %vm5694, %v5693, %v5408
  %vm5696 = vcmp.lt.s32.totalorder %v5695, %v5424
  %v5697 = vsel %vm5696, %v5695, %v5424
  %vm5698 = vcmp.lt.s32.totalorder %v5697, %v5440
  %v5699 = vsel %vm5698, %v5697, %v5440
  %vm5700 = vcmp.lt.s32.totalorder %v5699, %v5456
  %v5701 = vsel %vm5700, %v5699, %v5456
  %vm5702 = vcmp.lt.s32.totalorder %v5701, %v5472
  %v5703 = vsel %vm5702, %v5701, %v5472
  %vm5704 = vcmp.lt.s32.totalorder %v5703, %v5488
  %v5705 = vsel %vm5704, %v5703, %v5488
  %vm5706 = vcmp.lt.s32.totalorder %v5705, %v5504
  %v5707 = vsel %vm5706, %v5705, %v5504
  %vm5708 = vcmp.lt.s32.totalorder %v5707, %v5520
  %v5709 = vsel %vm5708, %v5707, %v5520
  %vm5710 = vcmp.lt.s32.totalorder %v5709, %v5536
  %v5711 = vsel %vm5710, %v5709, %v5536
  %vm5712 = vcmp.lt.s32.totalorder %v5711, %v5552
  %v5713 = vsel %vm5712, %v5711, %v5552
  %vm5714 = vcmp.lt.s32.totalorder %v5713, %v5568
  %v5715 = vsel %vm5714, %v5713, %v5568
  %v5716 = vrot.slane %v5715, 4
  %vm5717 = vcmp.lt.s32.totalorder %v5715, %v5716
  %v5718 = vsel %vm5717, %v5715, %v5716
  %v5719 = vrot.slane %v5718, 2
  %vm5720 = vcmp.lt.s32.totalorder %v5718, %v5719
  %v5721 = vsel %vm5720, %v5718, %v5719
  %v5722 = vrot.slane %v5721, 1
  %vm5723 = vcmp.lt.s32.totalorder %v5721, %v5722
  %v5724 = vsel %vm5723, %v5721, %v5722
  %vm5725 = vcmp.lt.s32.totalorder %v5073, %v5089
  %v5726 = vsel %vm5725, %v5073, %v5089
  %vm5727 = vcmp.lt.s32.totalorder %v5726, %v5105
  %v5728 = vsel %vm5727, %v5726, %v5105
  %vm5729 = vcmp.lt.s32.totalorder %v5728, %v5121
  %v5730 = vsel %vm5729, %v5728, %v5121
  %vm5731 = vcmp.lt.s32.totalorder %v5730, %v5137
  %v5732 = vsel %vm5731, %v5730, %v5137
  %vm5733 = vcmp.lt.s32.totalorder %v5732, %v5153
  %v5734 = vsel %vm5733, %v5732, %v5153
  %vm5735 = vcmp.lt.s32.totalorder %v5734, %v5169
  %v5736 = vsel %vm5735, %v5734, %v5169
  %vm5737 = vcmp.lt.s32.totalorder %v5736, %v5185
  %v5738 = vsel %vm5737, %v5736, %v5185
  %vm5739 = vcmp.lt.s32.totalorder %v5738, %v5201
  %v5740 = vsel %vm5739, %v5738, %v5201
  %vm5741 = vcmp.lt.s32.totalorder %v5740, %v5217
  %v5742 = vsel %vm5741, %v5740, %v5217
  %vm5743 = vcmp.lt.s32.totalorder %v5742, %v5233
  %v5744 = vsel %vm5743, %v5742, %v5233
  %vm5745 = vcmp.lt.s32.totalorder %v5744, %v5249
  %v5746 = vsel %vm5745, %v5744, %v5249
  %vm5747 = vcmp.lt.s32.totalorder %v5746, %v5265
  %v5748 = vsel %vm5747, %v5746, %v5265
  %vm5749 = vcmp.lt.s32.totalorder %v5748, %v5281
  %v5750 = vsel %vm5749, %v5748, %v5281
  %vm5751 = vcmp.lt.s32.totalorder %v5750, %v5297
  %v5752 = vsel %vm5751, %v5750, %v5297
  %vm5753 = vcmp.lt.s32.totalorder %v5752, %v5313
  %v5754 = vsel %vm5753, %v5752, %v5313
  %vm5755 = vcmp.lt.s32.totalorder %v5754, %v5329
  %v5756 = vsel %vm5755, %v5754, %v5329
  %vm5757 = vcmp.lt.s32.totalorder %v5756, %v5345
  %v5758 = vsel %vm5757, %v5756, %v5345
  %vm5759 = vcmp.lt.s32.totalorder %v5758, %v5361
  %v5760 = vsel %vm5759, %v5758, %v5361
  %vm5761 = vcmp.lt.s32.totalorder %v5760, %v5377
  %v5762 = vsel %vm5761, %v5760, %v5377
  %vm5763 = vcmp.lt.s32.totalorder %v5762, %v5393
  %v5764 = vsel %vm5763, %v5762, %v5393
  %vm5765 = vcmp.lt.s32.totalorder %v5764, %v5409
  %v5766 = vsel %vm5765, %v5764, %v5409
  %vm5767 = vcmp.lt.s32.totalorder %v5766, %v5425
  %v5768 = vsel %vm5767, %v5766, %v5425
  %vm5769 = vcmp.lt.s32.totalorder %v5768, %v5441
  %v5770 = vsel %vm5769, %v5768, %v5441
  %vm5771 = vcmp.lt.s32.totalorder %v5770, %v5457
  %v5772 = vsel %vm5771, %v5770, %v5457
  %vm5773 = vcmp.lt.s32.totalorder %v5772, %v5473
  %v5774 = vsel %vm5773, %v5772, %v5473
  %vm5775 = vcmp.lt.s32.totalorder %v5774, %v5489
  %v5776 = vsel %vm5775, %v5774, %v5489
  %vm5777 = vcmp.lt.s32.totalorder %v5776, %v5505
  %v5778 = vsel %vm5777, %v5776, %v5505
  %vm5779 = vcmp.lt.s32.totalorder %v5778, %v5521
  %v5780 = vsel %vm5779, %v5778, %v5521
  %vm5781 = vcmp.lt.s32.totalorder %v5780, %v5537
  %v5782 = vsel %vm5781, %v5780, %v5537
  %vm5783 = vcmp.lt.s32.totalorder %v5782, %v5553
  %v5784 = vsel %vm5783, %v5782, %v5553
  %vm5785 = vcmp.lt.s32.totalorder %v5784, %v5569
  %v5786 = vsel %vm5785, %v5784, %v5569
  %v5787 = vrot.slane %v5786, 4
  %vm5788 = vcmp.lt.s32.totalorder %v5786, %v5787
  %v5789 = vsel %vm5788, %v5786, %v5787
  %v5790 = vrot.slane %v5789, 2
  %vm5791 = vcmp.lt.s32.totalorder %v5789, %v5790
  %v5792 = vsel %vm5791, %v5789, %v5790
  %v5793 = vrot.slane %v5792, 1
  %vm5794 = vcmp.lt.s32.totalorder %v5792, %v5793
  %v5795 = vsel %vm5794, %v5792, %v5793
  %vm5796 = vcmp.lt.s32.totalorder %v5074, %v5090
  %v5797 = vsel %vm5796, %v5074, %v5090
  %vm5798 = vcmp.lt.s32.totalorder %v5797, %v5106
  %v5799 = vsel %vm5798, %v5797, %v5106
  %vm5800 = vcmp.lt.s32.totalorder %v5799, %v5122
  %v5801 = vsel %vm5800, %v5799, %v5122
  %vm5802 = vcmp.lt.s32.totalorder %v5801, %v5138
  %v5803 = vsel %vm5802, %v5801, %v5138
  %vm5804 = vcmp.lt.s32.totalorder %v5803, %v5154
  %v5805 = vsel %vm5804, %v5803, %v5154
  %vm5806 = vcmp.lt.s32.totalorder %v5805, %v5170
  %v5807 = vsel %vm5806, %v5805, %v5170
  %vm5808 = vcmp.lt.s32.totalorder %v5807, %v5186
  %v5809 = vsel %vm5808, %v5807, %v5186
  %vm5810 = vcmp.lt.s32.totalorder %v5809, %v5202
  %v5811 = vsel %vm5810, %v5809, %v5202
  %vm5812 = vcmp.lt.s32.totalorder %v5811, %v5218
  %v5813 = vsel %vm5812, %v5811, %v5218
  %vm5814 = vcmp.lt.s32.totalorder %v5813, %v5234
  %v5815 = vsel %vm5814, %v5813, %v5234
  %vm5816 = vcmp.lt.s32.totalorder %v5815, %v5250
  %v5817 = vsel %vm5816, %v5815, %v5250
  %vm5818 = vcmp.lt.s32.totalorder %v5817, %v5266
  %v5819 = vsel %vm5818, %v5817, %v5266
  %vm5820 = vcmp.lt.s32.totalorder %v5819, %v5282
  %v5821 = vsel %vm5820, %v5819, %v5282
  %vm5822 = vcmp.lt.s32.totalorder %v5821, %v5298
  %v5823 = vsel %vm5822, %v5821, %v5298
  %vm5824 = vcmp.lt.s32.totalorder %v5823, %v5314
  %v5825 = vsel %vm5824, %v5823, %v5314
  %vm5826 = vcmp.lt.s32.totalorder %v5825, %v5330
  %v5827 = vsel %vm5826, %v5825, %v5330
  %vm5828 = vcmp.lt.s32.totalorder %v5827, %v5346
  %v5829 = vsel %vm5828, %v5827, %v5346
  %vm5830 = vcmp.lt.s32.totalorder %v5829, %v5362
  %v5831 = vsel %vm5830, %v5829, %v5362
  %vm5832 = vcmp.lt.s32.totalorder %v5831, %v5378
  %v5833 = vsel %vm5832, %v5831, %v5378
  %vm5834 = vcmp.lt.s32.totalorder %v5833, %v5394
  %v5835 = vsel %vm5834, %v5833, %v5394
  %vm5836 = vcmp.lt.s32.totalorder %v5835, %v5410
  %v5837 = vsel %vm5836, %v5835, %v5410
  %vm5838 = vcmp.lt.s32.totalorder %v5837, %v5426
  %v5839 = vsel %vm5838, %v5837, %v5426
  %vm5840 = vcmp.lt.s32.totalorder %v5839, %v5442
  %v5841 = vsel %vm5840, %v5839, %v5442
  %vm5842 = vcmp.lt.s32.totalorder %v5841, %v5458
  %v5843 = vsel %vm5842, %v5841, %v5458
  %vm5844 = vcmp.lt.s32.totalorder %v5843, %v5474
  %v5845 = vsel %vm5844, %v5843, %v5474
  %vm5846 = vcmp.lt.s32.totalorder %v5845, %v5490
  %v5847 = vsel %vm5846, %v5845, %v5490
  %vm5848 = vcmp.lt.s32.totalorder %v5847, %v5506
  %v5849 = vsel %vm5848, %v5847, %v5506
  %vm5850 = vcmp.lt.s32.totalorder %v5849, %v5522
  %v5851 = vsel %vm5850, %v5849, %v5522
  %vm5852 = vcmp.lt.s32.totalorder %v5851, %v5538
  %v5853 = vsel %vm5852, %v5851, %v5538
  %vm5854 = vcmp.lt.s32.totalorder %v5853, %v5554
  %v5855 = vsel %vm5854, %v5853, %v5554
  %vm5856 = vcmp.lt.s32.totalorder %v5855, %v5570
  %v5857 = vsel %vm5856, %v5855, %v5570
  %v5858 = vrot.slane %v5857, 4
  %vm5859 = vcmp.lt.s32.totalorder %v5857, %v5858
  %v5860 = vsel %vm5859, %v5857, %v5858
  %v5861 = vrot.slane %v5860, 2
  %vm5862 = vcmp.lt.s32.totalorder %v5860, %v5861
  %v5863 = vsel %vm5862, %v5860, %v5861
  %v5864 = vrot.slane %v5863, 1
  %vm5865 = vcmp.lt.s32.totalorder %v5863, %v5864
  %v5866 = vsel %vm5865, %v5863, %v5864
  %vm5867 = vcmp.lt.s32.totalorder %v5075, %v5091
  %v5868 = vsel %vm5867, %v5075, %v5091
  %vm5869 = vcmp.lt.s32.totalorder %v5868, %v5107
  %v5870 = vsel %vm5869, %v5868, %v5107
  %vm5871 = vcmp.lt.s32.totalorder %v5870, %v5123
  %v5872 = vsel %vm5871, %v5870, %v5123
  %vm5873 = vcmp.lt.s32.totalorder %v5872, %v5139
  %v5874 = vsel %vm5873, %v5872, %v5139
  %vm5875 = vcmp.lt.s32.totalorder %v5874, %v5155
  %v5876 = vsel %vm5875, %v5874, %v5155
  %vm5877 = vcmp.lt.s32.totalorder %v5876, %v5171
  %v5878 = vsel %vm5877, %v5876, %v5171
  %vm5879 = vcmp.lt.s32.totalorder %v5878, %v5187
  %v5880 = vsel %vm5879, %v5878, %v5187
  %vm5881 = vcmp.lt.s32.totalorder %v5880, %v5203
  %v5882 = vsel %vm5881, %v5880, %v5203
  %vm5883 = vcmp.lt.s32.totalorder %v5882, %v5219
  %v5884 = vsel %vm5883, %v5882, %v5219
  %vm5885 = vcmp.lt.s32.totalorder %v5884, %v5235
  %v5886 = vsel %vm5885, %v5884, %v5235
  %vm5887 = vcmp.lt.s32.totalorder %v5886, %v5251
  %v5888 = vsel %vm5887, %v5886, %v5251
  %vm5889 = vcmp.lt.s32.totalorder %v5888, %v5267
  %v5890 = vsel %vm5889, %v5888, %v5267
  %vm5891 = vcmp.lt.s32.totalorder %v5890, %v5283
  %v5892 = vsel %vm5891, %v5890, %v5283
  %vm5893 = vcmp.lt.s32.totalorder %v5892, %v5299
  %v5894 = vsel %vm5893, %v5892, %v5299
  %vm5895 = vcmp.lt.s32.totalorder %v5894, %v5315
  %v5896 = vsel %vm5895, %v5894, %v5315
  %vm5897 = vcmp.lt.s32.totalorder %v5896, %v5331
  %v5898 = vsel %vm5897, %v5896, %v5331
  %vm5899 = vcmp.lt.s32.totalorder %v5898, %v5347
  %v5900 = vsel %vm5899, %v5898, %v5347
  %vm5901 = vcmp.lt.s32.totalorder %v5900, %v5363
  %v5902 = vsel %vm5901, %v5900, %v5363
  %vm5903 = vcmp.lt.s32.totalorder %v5902, %v5379
  %v5904 = vsel %vm5903, %v5902, %v5379
  %vm5905 = vcmp.lt.s32.totalorder %v5904, %v5395
  %v5906 = vsel %vm5905, %v5904, %v5395
  %vm5907 = vcmp.lt.s32.totalorder %v5906, %v5411
  %v5908 = vsel %vm5907, %v5906, %v5411
  %vm5909 = vcmp.lt.s32.totalorder %v5908, %v5427
  %v5910 = vsel %vm5909, %v5908, %v5427
  %vm5911 = vcmp.lt.s32.totalorder %v5910, %v5443
  %v5912 = vsel %vm5911, %v5910, %v5443
  %vm5913 = vcmp.lt.s32.totalorder %v5912, %v5459
  %v5914 = vsel %vm5913, %v5912, %v5459
  %vm5915 = vcmp.lt.s32.totalorder %v5914, %v5475
  %v5916 = vsel %vm5915, %v5914, %v5475
  %vm5917 = vcmp.lt.s32.totalorder %v5916, %v5491
  %v5918 = vsel %vm5917, %v5916, %v5491
  %vm5919 = vcmp.lt.s32.totalorder %v5918, %v5507
  %v5920 = vsel %vm5919, %v5918, %v5507
  %vm5921 = vcmp.lt.s32.totalorder %v5920, %v5523
  %v5922 = vsel %vm5921, %v5920, %v5523
  %vm5923 = vcmp.lt.s32.totalorder %v5922, %v5539
  %v5924 = vsel %vm5923, %v5922, %v5539
  %vm5925 = vcmp.lt.s32.totalorder %v5924, %v5555
  %v5926 = vsel %vm5925, %v5924, %v5555
  %vm5927 = vcmp.lt.s32.totalorder %v5926, %v5571
  %v5928 = vsel %vm5927, %v5926, %v5571
  %v5929 = vrot.slane %v5928, 4
  %vm5930 = vcmp.lt.s32.totalorder %v5928, %v5929
  %v5931 = vsel %vm5930, %v5928, %v5929
  %v5932 = vrot.slane %v5931, 2
  %vm5933 = vcmp.lt.s32.totalorder %v5931, %v5932
  %v5934 = vsel %vm5933, %v5931, %v5932
  %v5935 = vrot.slane %v5934, 1
  %vm5936 = vcmp.lt.s32.totalorder %v5934, %v5935
  %v5937 = vsel %vm5936, %v5934, %v5935
  %vm5938 = vcmp.lt.s32.totalorder %v5076, %v5092
  %v5939 = vsel %vm5938, %v5076, %v5092
  %vm5940 = vcmp.lt.s32.totalorder %v5939, %v5108
  %v5941 = vsel %vm5940, %v5939, %v5108
  %vm5942 = vcmp.lt.s32.totalorder %v5941, %v5124
  %v5943 = vsel %vm5942, %v5941, %v5124
  %vm5944 = vcmp.lt.s32.totalorder %v5943, %v5140
  %v5945 = vsel %vm5944, %v5943, %v5140
  %vm5946 = vcmp.lt.s32.totalorder %v5945, %v5156
  %v5947 = vsel %vm5946, %v5945, %v5156
  %vm5948 = vcmp.lt.s32.totalorder %v5947, %v5172
  %v5949 = vsel %vm5948, %v5947, %v5172
  %vm5950 = vcmp.lt.s32.totalorder %v5949, %v5188
  %v5951 = vsel %vm5950, %v5949, %v5188
  %vm5952 = vcmp.lt.s32.totalorder %v5951, %v5204
  %v5953 = vsel %vm5952, %v5951, %v5204
  %vm5954 = vcmp.lt.s32.totalorder %v5953, %v5220
  %v5955 = vsel %vm5954, %v5953, %v5220
  %vm5956 = vcmp.lt.s32.totalorder %v5955, %v5236
  %v5957 = vsel %vm5956, %v5955, %v5236
  %vm5958 = vcmp.lt.s32.totalorder %v5957, %v5252
  %v5959 = vsel %vm5958, %v5957, %v5252
  %vm5960 = vcmp.lt.s32.totalorder %v5959, %v5268
  %v5961 = vsel %vm5960, %v5959, %v5268
  %vm5962 = vcmp.lt.s32.totalorder %v5961, %v5284
  %v5963 = vsel %vm5962, %v5961, %v5284
  %vm5964 = vcmp.lt.s32.totalorder %v5963, %v5300
  %v5965 = vsel %vm5964, %v5963, %v5300
  %vm5966 = vcmp.lt.s32.totalorder %v5965, %v5316
  %v5967 = vsel %vm5966, %v5965, %v5316
  %vm5968 = vcmp.lt.s32.totalorder %v5967, %v5332
  %v5969 = vsel %vm5968, %v5967, %v5332
  %vm5970 = vcmp.lt.s32.totalorder %v5969, %v5348
  %v5971 = vsel %vm5970, %v5969, %v5348
  %vm5972 = vcmp.lt.s32.totalorder %v5971, %v5364
  %v5973 = vsel %vm5972, %v5971, %v5364
  %vm5974 = vcmp.lt.s32.totalorder %v5973, %v5380
  %v5975 = vsel %vm5974, %v5973, %v5380
  %vm5976 = vcmp.lt.s32.totalorder %v5975, %v5396
  %v5977 = vsel %vm5976, %v5975, %v5396
  %vm5978 = vcmp.lt.s32.totalorder %v5977, %v5412
  %v5979 = vsel %vm5978, %v5977, %v5412
  %vm5980 = vcmp.lt.s32.totalorder %v5979, %v5428
  %v5981 = vsel %vm5980, %v5979, %v5428
  %vm5982 = vcmp.lt.s32.totalorder %v5981, %v5444
  %v5983 = vsel %vm5982, %v5981, %v5444
  %vm5984 = vcmp.lt.s32.totalorder %v5983, %v5460
  %v5985 = vsel %vm5984, %v5983, %v5460
  %vm5986 = vcmp.lt.s32.totalorder %v5985, %v5476
  %v5987 = vsel %vm5986, %v5985, %v5476
  %vm5988 = vcmp.lt.s32.totalorder %v5987, %v5492
  %v5989 = vsel %vm5988, %v5987, %v5492
  %vm5990 = vcmp.lt.s32.totalorder %v5989, %v5508
  %v5991 = vsel %vm5990, %v5989, %v5508
  %vm5992 = vcmp.lt.s32.totalorder %v5991, %v5524
  %v5993 = vsel %vm5992, %v5991, %v5524
  %vm5994 = vcmp.lt.s32.totalorder %v5993, %v5540
  %v5995 = vsel %vm5994, %v5993, %v5540
  %vm5996 = vcmp.lt.s32.totalorder %v5995, %v5556
  %v5997 = vsel %vm5996, %v5995, %v5556
  %vm5998 = vcmp.lt.s32.totalorder %v5997, %v5572
  %v5999 = vsel %vm5998, %v5997, %v5572
  %v6000 = vrot.slane %v5999, 4
  %vm6001 = vcmp.lt.s32.totalorder %v5999, %v6000
  %v6002 = vsel %vm6001, %v5999, %v6000
  %v6003 = vrot.slane %v6002, 2
  %vm6004 = vcmp.lt.s32.totalorder %v6002, %v6003
  %v6005 = vsel %vm6004, %v6002, %v6003
  %v6006 = vrot.slane %v6005, 1
  %vm6007 = vcmp.lt.s32.totalorder %v6005, %v6006
  %v6008 = vsel %vm6007, %v6005, %v6006
  %vm6009 = vcmp.lt.s32.totalorder %v5077, %v5093
  %v6010 = vsel %vm6009, %v5077, %v5093
  %vm6011 = vcmp.lt.s32.totalorder %v6010, %v5109
  %v6012 = vsel %vm6011, %v6010, %v5109
  %vm6013 = vcmp.lt.s32.totalorder %v6012, %v5125
  %v6014 = vsel %vm6013, %v6012, %v5125
  %vm6015 = vcmp.lt.s32.totalorder %v6014, %v5141
  %v6016 = vsel %vm6015, %v6014, %v5141
  %vm6017 = vcmp.lt.s32.totalorder %v6016, %v5157
  %v6018 = vsel %vm6017, %v6016, %v5157
  %vm6019 = vcmp.lt.s32.totalorder %v6018, %v5173
  %v6020 = vsel %vm6019, %v6018, %v5173
  %vm6021 = vcmp.lt.s32.totalorder %v6020, %v5189
  %v6022 = vsel %vm6021, %v6020, %v5189
  %vm6023 = vcmp.lt.s32.totalorder %v6022, %v5205
  %v6024 = vsel %vm6023, %v6022, %v5205
  %vm6025 = vcmp.lt.s32.totalorder %v6024, %v5221
  %v6026 = vsel %vm6025, %v6024, %v5221
  %vm6027 = vcmp.lt.s32.totalorder %v6026, %v5237
  %v6028 = vsel %vm6027, %v6026, %v5237
  %vm6029 = vcmp.lt.s32.totalorder %v6028, %v5253
  %v6030 = vsel %vm6029, %v6028, %v5253
  %vm6031 = vcmp.lt.s32.totalorder %v6030, %v5269
  %v6032 = vsel %vm6031, %v6030, %v5269
  %vm6033 = vcmp.lt.s32.totalorder %v6032, %v5285
  %v6034 = vsel %vm6033, %v6032, %v5285
  %vm6035 = vcmp.lt.s32.totalorder %v6034, %v5301
  %v6036 = vsel %vm6035, %v6034, %v5301
  %vm6037 = vcmp.lt.s32.totalorder %v6036, %v5317
  %v6038 = vsel %vm6037, %v6036, %v5317
  %vm6039 = vcmp.lt.s32.totalorder %v6038, %v5333
  %v6040 = vsel %vm6039, %v6038, %v5333
  %vm6041 = vcmp.lt.s32.totalorder %v6040, %v5349
  %v6042 = vsel %vm6041, %v6040, %v5349
  %vm6043 = vcmp.lt.s32.totalorder %v6042, %v5365
  %v6044 = vsel %vm6043, %v6042, %v5365
  %vm6045 = vcmp.lt.s32.totalorder %v6044, %v5381
  %v6046 = vsel %vm6045, %v6044, %v5381
  %vm6047 = vcmp.lt.s32.totalorder %v6046, %v5397
  %v6048 = vsel %vm6047, %v6046, %v5397
  %vm6049 = vcmp.lt.s32.totalorder %v6048, %v5413
  %v6050 = vsel %vm6049, %v6048, %v5413
  %vm6051 = vcmp.lt.s32.totalorder %v6050, %v5429
  %v6052 = vsel %vm6051, %v6050, %v5429
  %vm6053 = vcmp.lt.s32.totalorder %v6052, %v5445
  %v6054 = vsel %vm6053, %v6052, %v5445
  %vm6055 = vcmp.lt.s32.totalorder %v6054, %v5461
  %v6056 = vsel %vm6055, %v6054, %v5461
  %vm6057 = vcmp.lt.s32.totalorder %v6056, %v5477
  %v6058 = vsel %vm6057, %v6056, %v5477
  %vm6059 = vcmp.lt.s32.totalorder %v6058, %v5493
  %v6060 = vsel %vm6059, %v6058, %v5493
  %vm6061 = vcmp.lt.s32.totalorder %v6060, %v5509
  %v6062 = vsel %vm6061, %v6060, %v5509
  %vm6063 = vcmp.lt.s32.totalorder %v6062, %v5525
  %v6064 = vsel %vm6063, %v6062, %v5525
  %vm6065 = vcmp.lt.s32.totalorder %v6064, %v5541
  %v6066 = vsel %vm6065, %v6064, %v5541
  %vm6067 = vcmp.lt.s32.totalorder %v6066, %v5557
  %v6068 = vsel %vm6067, %v6066, %v5557
  %vm6069 = vcmp.lt.s32.totalorder %v6068, %v5573
  %v6070 = vsel %vm6069, %v6068, %v5573
  %v6071 = vrot.slane %v6070, 4
  %vm6072 = vcmp.lt.s32.totalorder %v6070, %v6071
  %v6073 = vsel %vm6072, %v6070, %v6071
  %v6074 = vrot.slane %v6073, 2
  %vm6075 = vcmp.lt.s32.totalorder %v6073, %v6074
  %v6076 = vsel %vm6075, %v6073, %v6074
  %v6077 = vrot.slane %v6076, 1
  %vm6078 = vcmp.lt.s32.totalorder %v6076, %v6077
  %v6079 = vsel %vm6078, %v6076, %v6077
  %vm6080 = vcmp.lt.s32.totalorder %v5078, %v5094
  %v6081 = vsel %vm6080, %v5078, %v5094
  %vm6082 = vcmp.lt.s32.totalorder %v6081, %v5110
  %v6083 = vsel %vm6082, %v6081, %v5110
  %vm6084 = vcmp.lt.s32.totalorder %v6083, %v5126
  %v6085 = vsel %vm6084, %v6083, %v5126
  %vm6086 = vcmp.lt.s32.totalorder %v6085, %v5142
  %v6087 = vsel %vm6086, %v6085, %v5142
  %vm6088 = vcmp.lt.s32.totalorder %v6087, %v5158
  %v6089 = vsel %vm6088, %v6087, %v5158
  %vm6090 = vcmp.lt.s32.totalorder %v6089, %v5174
  %v6091 = vsel %vm6090, %v6089, %v5174
  %vm6092 = vcmp.lt.s32.totalorder %v6091, %v5190
  %v6093 = vsel %vm6092, %v6091, %v5190
  %vm6094 = vcmp.lt.s32.totalorder %v6093, %v5206
  %v6095 = vsel %vm6094, %v6093, %v5206
  %vm6096 = vcmp.lt.s32.totalorder %v6095, %v5222
  %v6097 = vsel %vm6096, %v6095, %v5222
  %vm6098 = vcmp.lt.s32.totalorder %v6097, %v5238
  %v6099 = vsel %vm6098, %v6097, %v5238
  %vm6100 = vcmp.lt.s32.totalorder %v6099, %v5254
  %v6101 = vsel %vm6100, %v6099, %v5254
  %vm6102 = vcmp.lt.s32.totalorder %v6101, %v5270
  %v6103 = vsel %vm6102, %v6101, %v5270
  %vm6104 = vcmp.lt.s32.totalorder %v6103, %v5286
  %v6105 = vsel %vm6104, %v6103, %v5286
  %vm6106 = vcmp.lt.s32.totalorder %v6105, %v5302
  %v6107 = vsel %vm6106, %v6105, %v5302
  %vm6108 = vcmp.lt.s32.totalorder %v6107, %v5318
  %v6109 = vsel %vm6108, %v6107, %v5318
  %vm6110 = vcmp.lt.s32.totalorder %v6109, %v5334
  %v6111 = vsel %vm6110, %v6109, %v5334
  %vm6112 = vcmp.lt.s32.totalorder %v6111, %v5350
  %v6113 = vsel %vm6112, %v6111, %v5350
  %vm6114 = vcmp.lt.s32.totalorder %v6113, %v5366
  %v6115 = vsel %vm6114, %v6113, %v5366
  %vm6116 = vcmp.lt.s32.totalorder %v6115, %v5382
  %v6117 = vsel %vm6116, %v6115, %v5382
  %vm6118 = vcmp.lt.s32.totalorder %v6117, %v5398
  %v6119 = vsel %vm6118, %v6117, %v5398
  %vm6120 = vcmp.lt.s32.totalorder %v6119, %v5414
  %v6121 = vsel %vm6120, %v6119, %v5414
  %vm6122 = vcmp.lt.s32.totalorder %v6121, %v5430
  %v6123 = vsel %vm6122, %v6121, %v5430
  %vm6124 = vcmp.lt.s32.totalorder %v6123, %v5446
  %v6125 = vsel %vm6124, %v6123, %v5446
  %vm6126 = vcmp.lt.s32.totalorder %v6125, %v5462
  %v6127 = vsel %vm6126, %v6125, %v5462
  %vm6128 = vcmp.lt.s32.totalorder %v6127, %v5478
  %v6129 = vsel %vm6128, %v6127, %v5478
  %vm6130 = vcmp.lt.s32.totalorder %v6129, %v5494
  %v6131 = vsel %vm6130, %v6129, %v5494
  %vm6132 = vcmp.lt.s32.totalorder %v6131, %v5510
  %v6133 = vsel %vm6132, %v6131, %v5510
  %vm6134 = vcmp.lt.s32.totalorder %v6133, %v5526
  %v6135 = vsel %vm6134, %v6133, %v5526
  %vm6136 = vcmp.lt.s32.totalorder %v6135, %v5542
  %v6137 = vsel %vm6136, %v6135, %v5542
  %vm6138 = vcmp.lt.s32.totalorder %v6137, %v5558
  %v6139 = vsel %vm6138, %v6137, %v5558
  %vm6140 = vcmp.lt.s32.totalorder %v6139, %v5574
  %v6141 = vsel %vm6140, %v6139, %v5574
  %v6142 = vrot.slane %v6141, 4
  %vm6143 = vcmp.lt.s32.totalorder %v6141, %v6142
  %v6144 = vsel %vm6143, %v6141, %v6142
  %v6145 = vrot.slane %v6144, 2
  %vm6146 = vcmp.lt.s32.totalorder %v6144, %v6145
  %v6147 = vsel %vm6146, %v6144, %v6145
  %v6148 = vrot.slane %v6147, 1
  %vm6149 = vcmp.lt.s32.totalorder %v6147, %v6148
  %v6150 = vsel %vm6149, %v6147, %v6148
  %vm6151 = vcmp.lt.s32.totalorder %v5079, %v5095
  %v6152 = vsel %vm6151, %v5079, %v5095
  %vm6153 = vcmp.lt.s32.totalorder %v6152, %v5111
  %v6154 = vsel %vm6153, %v6152, %v5111
  %vm6155 = vcmp.lt.s32.totalorder %v6154, %v5127
  %v6156 = vsel %vm6155, %v6154, %v5127
  %vm6157 = vcmp.lt.s32.totalorder %v6156, %v5143
  %v6158 = vsel %vm6157, %v6156, %v5143
  %vm6159 = vcmp.lt.s32.totalorder %v6158, %v5159
  %v6160 = vsel %vm6159, %v6158, %v5159
  %vm6161 = vcmp.lt.s32.totalorder %v6160, %v5175
  %v6162 = vsel %vm6161, %v6160, %v5175
  %vm6163 = vcmp.lt.s32.totalorder %v6162, %v5191
  %v6164 = vsel %vm6163, %v6162, %v5191
  %vm6165 = vcmp.lt.s32.totalorder %v6164, %v5207
  %v6166 = vsel %vm6165, %v6164, %v5207
  %vm6167 = vcmp.lt.s32.totalorder %v6166, %v5223
  %v6168 = vsel %vm6167, %v6166, %v5223
  %vm6169 = vcmp.lt.s32.totalorder %v6168, %v5239
  %v6170 = vsel %vm6169, %v6168, %v5239
  %vm6171 = vcmp.lt.s32.totalorder %v6170, %v5255
  %v6172 = vsel %vm6171, %v6170, %v5255
  %vm6173 = vcmp.lt.s32.totalorder %v6172, %v5271
  %v6174 = vsel %vm6173, %v6172, %v5271
  %vm6175 = vcmp.lt.s32.totalorder %v6174, %v5287
  %v6176 = vsel %vm6175, %v6174, %v5287
  %vm6177 = vcmp.lt.s32.totalorder %v6176, %v5303
  %v6178 = vsel %vm6177, %v6176, %v5303
  %vm6179 = vcmp.lt.s32.totalorder %v6178, %v5319
  %v6180 = vsel %vm6179, %v6178, %v5319
  %vm6181 = vcmp.lt.s32.totalorder %v6180, %v5335
  %v6182 = vsel %vm6181, %v6180, %v5335
  %vm6183 = vcmp.lt.s32.totalorder %v6182, %v5351
  %v6184 = vsel %vm6183, %v6182, %v5351
  %vm6185 = vcmp.lt.s32.totalorder %v6184, %v5367
  %v6186 = vsel %vm6185, %v6184, %v5367
  %vm6187 = vcmp.lt.s32.totalorder %v6186, %v5383
  %v6188 = vsel %vm6187, %v6186, %v5383
  %vm6189 = vcmp.lt.s32.totalorder %v6188, %v5399
  %v6190 = vsel %vm6189, %v6188, %v5399
  %vm6191 = vcmp.lt.s32.totalorder %v6190, %v5415
  %v6192 = vsel %vm6191, %v6190, %v5415
  %vm6193 = vcmp.lt.s32.totalorder %v6192, %v5431
  %v6194 = vsel %vm6193, %v6192, %v5431
  %vm6195 = vcmp.lt.s32.totalorder %v6194, %v5447
  %v6196 = vsel %vm6195, %v6194, %v5447
  %vm6197 = vcmp.lt.s32.totalorder %v6196, %v5463
  %v6198 = vsel %vm6197, %v6196, %v5463
  %vm6199 = vcmp.lt.s32.totalorder %v6198, %v5479
  %v6200 = vsel %vm6199, %v6198, %v5479
  %vm6201 = vcmp.lt.s32.totalorder %v6200, %v5495
  %v6202 = vsel %vm6201, %v6200, %v5495
  %vm6203 = vcmp.lt.s32.totalorder %v6202, %v5511
  %v6204 = vsel %vm6203, %v6202, %v5511
  %vm6205 = vcmp.lt.s32.totalorder %v6204, %v5527
  %v6206 = vsel %vm6205, %v6204, %v5527
  %vm6207 = vcmp.lt.s32.totalorder %v6206, %v5543
  %v6208 = vsel %vm6207, %v6206, %v5543
  %vm6209 = vcmp.lt.s32.totalorder %v6208, %v5559
  %v6210 = vsel %vm6209, %v6208, %v5559
  %vm6211 = vcmp.lt.s32.totalorder %v6210, %v5575
  %v6212 = vsel %vm6211, %v6210, %v5575
  %v6213 = vrot.slane %v6212, 4
  %vm6214 = vcmp.lt.s32.totalorder %v6212, %v6213
  %v6215 = vsel %vm6214, %v6212, %v6213
  %v6216 = vrot.slane %v6215, 2
  %vm6217 = vcmp.lt.s32.totalorder %v6215, %v6216
  %v6218 = vsel %vm6217, %v6215, %v6216
  %v6219 = vrot.slane %v6218, 1
  %vm6220 = vcmp.lt.s32.totalorder %v6218, %v6219
  %v6221 = vsel %vm6220, %v6218, %v6219
  %vm6222 = vcmp.lt.s32.totalorder %v5080, %v5096
  %v6223 = vsel %vm6222, %v5080, %v5096
  %vm6224 = vcmp.lt.s32.totalorder %v6223, %v5112
  %v6225 = vsel %vm6224, %v6223, %v5112
  %vm6226 = vcmp.lt.s32.totalorder %v6225, %v5128
  %v6227 = vsel %vm6226, %v6225, %v5128
  %vm6228 = vcmp.lt.s32.totalorder %v6227, %v5144
  %v6229 = vsel %vm6228, %v6227, %v5144
  %vm6230 = vcmp.lt.s32.totalorder %v6229, %v5160
  %v6231 = vsel %vm6230, %v6229, %v5160
  %vm6232 = vcmp.lt.s32.totalorder %v6231, %v5176
  %v6233 = vsel %vm6232, %v6231, %v5176
  %vm6234 = vcmp.lt.s32.totalorder %v6233, %v5192
  %v6235 = vsel %vm6234, %v6233, %v5192
  %vm6236 = vcmp.lt.s32.totalorder %v6235, %v5208
  %v6237 = vsel %vm6236, %v6235, %v5208
  %vm6238 = vcmp.lt.s32.totalorder %v6237, %v5224
  %v6239 = vsel %vm6238, %v6237, %v5224
  %vm6240 = vcmp.lt.s32.totalorder %v6239, %v5240
  %v6241 = vsel %vm6240, %v6239, %v5240
  %vm6242 = vcmp.lt.s32.totalorder %v6241, %v5256
  %v6243 = vsel %vm6242, %v6241, %v5256
  %vm6244 = vcmp.lt.s32.totalorder %v6243, %v5272
  %v6245 = vsel %vm6244, %v6243, %v5272
  %vm6246 = vcmp.lt.s32.totalorder %v6245, %v5288
  %v6247 = vsel %vm6246, %v6245, %v5288
  %vm6248 = vcmp.lt.s32.totalorder %v6247, %v5304
  %v6249 = vsel %vm6248, %v6247, %v5304
  %vm6250 = vcmp.lt.s32.totalorder %v6249, %v5320
  %v6251 = vsel %vm6250, %v6249, %v5320
  %vm6252 = vcmp.lt.s32.totalorder %v6251, %v5336
  %v6253 = vsel %vm6252, %v6251, %v5336
  %vm6254 = vcmp.lt.s32.totalorder %v6253, %v5352
  %v6255 = vsel %vm6254, %v6253, %v5352
  %vm6256 = vcmp.lt.s32.totalorder %v6255, %v5368
  %v6257 = vsel %vm6256, %v6255, %v5368
  %vm6258 = vcmp.lt.s32.totalorder %v6257, %v5384
  %v6259 = vsel %vm6258, %v6257, %v5384
  %vm6260 = vcmp.lt.s32.totalorder %v6259, %v5400
  %v6261 = vsel %vm6260, %v6259, %v5400
  %vm6262 = vcmp.lt.s32.totalorder %v6261, %v5416
  %v6263 = vsel %vm6262, %v6261, %v5416
  %vm6264 = vcmp.lt.s32.totalorder %v6263, %v5432
  %v6265 = vsel %vm6264, %v6263, %v5432
  %vm6266 = vcmp.lt.s32.totalorder %v6265, %v5448
  %v6267 = vsel %vm6266, %v6265, %v5448
  %vm6268 = vcmp.lt.s32.totalorder %v6267, %v5464
  %v6269 = vsel %vm6268, %v6267, %v5464
  %vm6270 = vcmp.lt.s32.totalorder %v6269, %v5480
  %v6271 = vsel %vm6270, %v6269, %v5480
  %vm6272 = vcmp.lt.s32.totalorder %v6271, %v5496
  %v6273 = vsel %vm6272, %v6271, %v5496
  %vm6274 = vcmp.lt.s32.totalorder %v6273, %v5512
  %v6275 = vsel %vm6274, %v6273, %v5512
  %vm6276 = vcmp.lt.s32.totalorder %v6275, %v5528
  %v6277 = vsel %vm6276, %v6275, %v5528
  %vm6278 = vcmp.lt.s32.totalorder %v6277, %v5544
  %v6279 = vsel %vm6278, %v6277, %v5544
  %vm6280 = vcmp.lt.s32.totalorder %v6279, %v5560
  %v6281 = vsel %vm6280, %v6279, %v5560
  %vm6282 = vcmp.lt.s32.totalorder %v6281, %v5576
  %v6283 = vsel %vm6282, %v6281, %v5576
  %v6284 = vrot.slane %v6283, 4
  %vm6285 = vcmp.lt.s32.totalorder %v6283, %v6284
  %v6286 = vsel %vm6285, %v6283, %v6284
  %v6287 = vrot.slane %v6286, 2
  %vm6288 = vcmp.lt.s32.totalorder %v6286, %v6287
  %v6289 = vsel %vm6288, %v6286, %v6287
  %v6290 = vrot.slane %v6289, 1
  %vm6291 = vcmp.lt.s32.totalorder %v6289, %v6290
  %v6292 = vsel %vm6291, %v6289, %v6290
  %vm6293 = vcmp.lt.s32.totalorder %v5081, %v5097
  %v6294 = vsel %vm6293, %v5081, %v5097
  %vm6295 = vcmp.lt.s32.totalorder %v6294, %v5113
  %v6296 = vsel %vm6295, %v6294, %v5113
  %vm6297 = vcmp.lt.s32.totalorder %v6296, %v5129
  %v6298 = vsel %vm6297, %v6296, %v5129
  %vm6299 = vcmp.lt.s32.totalorder %v6298, %v5145
  %v6300 = vsel %vm6299, %v6298, %v5145
  %vm6301 = vcmp.lt.s32.totalorder %v6300, %v5161
  %v6302 = vsel %vm6301, %v6300, %v5161
  %vm6303 = vcmp.lt.s32.totalorder %v6302, %v5177
  %v6304 = vsel %vm6303, %v6302, %v5177
  %vm6305 = vcmp.lt.s32.totalorder %v6304, %v5193
  %v6306 = vsel %vm6305, %v6304, %v5193
  %vm6307 = vcmp.lt.s32.totalorder %v6306, %v5209
  %v6308 = vsel %vm6307, %v6306, %v5209
  %vm6309 = vcmp.lt.s32.totalorder %v6308, %v5225
  %v6310 = vsel %vm6309, %v6308, %v5225
  %vm6311 = vcmp.lt.s32.totalorder %v6310, %v5241
  %v6312 = vsel %vm6311, %v6310, %v5241
  %vm6313 = vcmp.lt.s32.totalorder %v6312, %v5257
  %v6314 = vsel %vm6313, %v6312, %v5257
  %vm6315 = vcmp.lt.s32.totalorder %v6314, %v5273
  %v6316 = vsel %vm6315, %v6314, %v5273
  %vm6317 = vcmp.lt.s32.totalorder %v6316, %v5289
  %v6318 = vsel %vm6317, %v6316, %v5289
  %vm6319 = vcmp.lt.s32.totalorder %v6318, %v5305
  %v6320 = vsel %vm6319, %v6318, %v5305
  %vm6321 = vcmp.lt.s32.totalorder %v6320, %v5321
  %v6322 = vsel %vm6321, %v6320, %v5321
  %vm6323 = vcmp.lt.s32.totalorder %v6322, %v5337
  %v6324 = vsel %vm6323, %v6322, %v5337
  %vm6325 = vcmp.lt.s32.totalorder %v6324, %v5353
  %v6326 = vsel %vm6325, %v6324, %v5353
  %vm6327 = vcmp.lt.s32.totalorder %v6326, %v5369
  %v6328 = vsel %vm6327, %v6326, %v5369
  %vm6329 = vcmp.lt.s32.totalorder %v6328, %v5385
  %v6330 = vsel %vm6329, %v6328, %v5385
  %vm6331 = vcmp.lt.s32.totalorder %v6330, %v5401
  %v6332 = vsel %vm6331, %v6330, %v5401
  %vm6333 = vcmp.lt.s32.totalorder %v6332, %v5417
  %v6334 = vsel %vm6333, %v6332, %v5417
  %vm6335 = vcmp.lt.s32.totalorder %v6334, %v5433
  %v6336 = vsel %vm6335, %v6334, %v5433
  %vm6337 = vcmp.lt.s32.totalorder %v6336, %v5449
  %v6338 = vsel %vm6337, %v6336, %v5449
  %vm6339 = vcmp.lt.s32.totalorder %v6338, %v5465
  %v6340 = vsel %vm6339, %v6338, %v5465
  %vm6341 = vcmp.lt.s32.totalorder %v6340, %v5481
  %v6342 = vsel %vm6341, %v6340, %v5481
  %vm6343 = vcmp.lt.s32.totalorder %v6342, %v5497
  %v6344 = vsel %vm6343, %v6342, %v5497
  %vm6345 = vcmp.lt.s32.totalorder %v6344, %v5513
  %v6346 = vsel %vm6345, %v6344, %v5513
  %vm6347 = vcmp.lt.s32.totalorder %v6346, %v5529
  %v6348 = vsel %vm6347, %v6346, %v5529
  %vm6349 = vcmp.lt.s32.totalorder %v6348, %v5545
  %v6350 = vsel %vm6349, %v6348, %v5545
  %vm6351 = vcmp.lt.s32.totalorder %v6350, %v5561
  %v6352 = vsel %vm6351, %v6350, %v5561
  %vm6353 = vcmp.lt.s32.totalorder %v6352, %v5577
  %v6354 = vsel %vm6353, %v6352, %v5577
  %v6355 = vrot.slane %v6354, 4
  %vm6356 = vcmp.lt.s32.totalorder %v6354, %v6355
  %v6357 = vsel %vm6356, %v6354, %v6355
  %v6358 = vrot.slane %v6357, 2
  %vm6359 = vcmp.lt.s32.totalorder %v6357, %v6358
  %v6360 = vsel %vm6359, %v6357, %v6358
  %v6361 = vrot.slane %v6360, 1
  %vm6362 = vcmp.lt.s32.totalorder %v6360, %v6361
  %v6363 = vsel %vm6362, %v6360, %v6361
  %vm6364 = vcmp.lt.s32.totalorder %v5082, %v5098
  %v6365 = vsel %vm6364, %v5082, %v5098
  %vm6366 = vcmp.lt.s32.totalorder %v6365, %v5114
  %v6367 = vsel %vm6366, %v6365, %v5114
  %vm6368 = vcmp.lt.s32.totalorder %v6367, %v5130
  %v6369 = vsel %vm6368, %v6367, %v5130
  %vm6370 = vcmp.lt.s32.totalorder %v6369, %v5146
  %v6371 = vsel %vm6370, %v6369, %v5146
  %vm6372 = vcmp.lt.s32.totalorder %v6371, %v5162
  %v6373 = vsel %vm6372, %v6371, %v5162
  %vm6374 = vcmp.lt.s32.totalorder %v6373, %v5178
  %v6375 = vsel %vm6374, %v6373, %v5178
  %vm6376 = vcmp.lt.s32.totalorder %v6375, %v5194
  %v6377 = vsel %vm6376, %v6375, %v5194
  %vm6378 = vcmp.lt.s32.totalorder %v6377, %v5210
  %v6379 = vsel %vm6378, %v6377, %v5210
  %vm6380 = vcmp.lt.s32.totalorder %v6379, %v5226
  %v6381 = vsel %vm6380, %v6379, %v5226
  %vm6382 = vcmp.lt.s32.totalorder %v6381, %v5242
  %v6383 = vsel %vm6382, %v6381, %v5242
  %vm6384 = vcmp.lt.s32.totalorder %v6383, %v5258
  %v6385 = vsel %vm6384, %v6383, %v5258
  %vm6386 = vcmp.lt.s32.totalorder %v6385, %v5274
  %v6387 = vsel %vm6386, %v6385, %v5274
  %vm6388 = vcmp.lt.s32.totalorder %v6387, %v5290
  %v6389 = vsel %vm6388, %v6387, %v5290
  %vm6390 = vcmp.lt.s32.totalorder %v6389, %v5306
  %v6391 = vsel %vm6390, %v6389, %v5306
  %vm6392 = vcmp.lt.s32.totalorder %v6391, %v5322
  %v6393 = vsel %vm6392, %v6391, %v5322
  %vm6394 = vcmp.lt.s32.totalorder %v6393, %v5338
  %v6395 = vsel %vm6394, %v6393, %v5338
  %vm6396 = vcmp.lt.s32.totalorder %v6395, %v5354
  %v6397 = vsel %vm6396, %v6395, %v5354
  %vm6398 = vcmp.lt.s32.totalorder %v6397, %v5370
  %v6399 = vsel %vm6398, %v6397, %v5370
  %vm6400 = vcmp.lt.s32.totalorder %v6399, %v5386
  %v6401 = vsel %vm6400, %v6399, %v5386
  %vm6402 = vcmp.lt.s32.totalorder %v6401, %v5402
  %v6403 = vsel %vm6402, %v6401, %v5402
  %vm6404 = vcmp.lt.s32.totalorder %v6403, %v5418
  %v6405 = vsel %vm6404, %v6403, %v5418
  %vm6406 = vcmp.lt.s32.totalorder %v6405, %v5434
  %v6407 = vsel %vm6406, %v6405, %v5434
  %vm6408 = vcmp.lt.s32.totalorder %v6407, %v5450
  %v6409 = vsel %vm6408, %v6407, %v5450
  %vm6410 = vcmp.lt.s32.totalorder %v6409, %v5466
  %v6411 = vsel %vm6410, %v6409, %v5466
  %vm6412 = vcmp.lt.s32.totalorder %v6411, %v5482
  %v6413 = vsel %vm6412, %v6411, %v5482
  %vm6414 = vcmp.lt.s32.totalorder %v6413, %v5498
  %v6415 = vsel %vm6414, %v6413, %v5498
  %vm6416 = vcmp.lt.s32.totalorder %v6415, %v5514
  %v6417 = vsel %vm6416, %v6415, %v5514
  %vm6418 = vcmp.lt.s32.totalorder %v6417, %v5530
  %v6419 = vsel %vm6418, %v6417, %v5530
  %vm6420 = vcmp.lt.s32.totalorder %v6419, %v5546
  %v6421 = vsel %vm6420, %v6419, %v5546
  %vm6422 = vcmp.lt.s32.totalorder %v6421, %v5562
  %v6423 = vsel %vm6422, %v6421, %v5562
  %vm6424 = vcmp.lt.s32.totalorder %v6423, %v5578
  %v6425 = vsel %vm6424, %v6423, %v5578
  %v6426 = vrot.slane %v6425, 4
  %vm6427 = vcmp.lt.s32.totalorder %v6425, %v6426
  %v6428 = vsel %vm6427, %v6425, %v6426
  %v6429 = vrot.slane %v6428, 2
  %vm6430 = vcmp.lt.s32.totalorder %v6428, %v6429
  %v6431 = vsel %vm6430, %v6428, %v6429
  %v6432 = vrot.slane %v6431, 1
  %vm6433 = vcmp.lt.s32.totalorder %v6431, %v6432
  %v6434 = vsel %vm6433, %v6431, %v6432
  %vm6435 = vcmp.lt.s32.totalorder %v5083, %v5099
  %v6436 = vsel %vm6435, %v5083, %v5099
  %vm6437 = vcmp.lt.s32.totalorder %v6436, %v5115
  %v6438 = vsel %vm6437, %v6436, %v5115
  %vm6439 = vcmp.lt.s32.totalorder %v6438, %v5131
  %v6440 = vsel %vm6439, %v6438, %v5131
  %vm6441 = vcmp.lt.s32.totalorder %v6440, %v5147
  %v6442 = vsel %vm6441, %v6440, %v5147
  %vm6443 = vcmp.lt.s32.totalorder %v6442, %v5163
  %v6444 = vsel %vm6443, %v6442, %v5163
  %vm6445 = vcmp.lt.s32.totalorder %v6444, %v5179
  %v6446 = vsel %vm6445, %v6444, %v5179
  %vm6447 = vcmp.lt.s32.totalorder %v6446, %v5195
  %v6448 = vsel %vm6447, %v6446, %v5195
  %vm6449 = vcmp.lt.s32.totalorder %v6448, %v5211
  %v6450 = vsel %vm6449, %v6448, %v5211
  %vm6451 = vcmp.lt.s32.totalorder %v6450, %v5227
  %v6452 = vsel %vm6451, %v6450, %v5227
  %vm6453 = vcmp.lt.s32.totalorder %v6452, %v5243
  %v6454 = vsel %vm6453, %v6452, %v5243
  %vm6455 = vcmp.lt.s32.totalorder %v6454, %v5259
  %v6456 = vsel %vm6455, %v6454, %v5259
  %vm6457 = vcmp.lt.s32.totalorder %v6456, %v5275
  %v6458 = vsel %vm6457, %v6456, %v5275
  %vm6459 = vcmp.lt.s32.totalorder %v6458, %v5291
  %v6460 = vsel %vm6459, %v6458, %v5291
  %vm6461 = vcmp.lt.s32.totalorder %v6460, %v5307
  %v6462 = vsel %vm6461, %v6460, %v5307
  %vm6463 = vcmp.lt.s32.totalorder %v6462, %v5323
  %v6464 = vsel %vm6463, %v6462, %v5323
  %vm6465 = vcmp.lt.s32.totalorder %v6464, %v5339
  %v6466 = vsel %vm6465, %v6464, %v5339
  %vm6467 = vcmp.lt.s32.totalorder %v6466, %v5355
  %v6468 = vsel %vm6467, %v6466, %v5355
  %vm6469 = vcmp.lt.s32.totalorder %v6468, %v5371
  %v6470 = vsel %vm6469, %v6468, %v5371
  %vm6471 = vcmp.lt.s32.totalorder %v6470, %v5387
  %v6472 = vsel %vm6471, %v6470, %v5387
  %vm6473 = vcmp.lt.s32.totalorder %v6472, %v5403
  %v6474 = vsel %vm6473, %v6472, %v5403
  %vm6475 = vcmp.lt.s32.totalorder %v6474, %v5419
  %v6476 = vsel %vm6475, %v6474, %v5419
  %vm6477 = vcmp.lt.s32.totalorder %v6476, %v5435
  %v6478 = vsel %vm6477, %v6476, %v5435
  %vm6479 = vcmp.lt.s32.totalorder %v6478, %v5451
  %v6480 = vsel %vm6479, %v6478, %v5451
  %vm6481 = vcmp.lt.s32.totalorder %v6480, %v5467
  %v6482 = vsel %vm6481, %v6480, %v5467
  %vm6483 = vcmp.lt.s32.totalorder %v6482, %v5483
  %v6484 = vsel %vm6483, %v6482, %v5483
  %vm6485 = vcmp.lt.s32.totalorder %v6484, %v5499
  %v6486 = vsel %vm6485, %v6484, %v5499
  %vm6487 = vcmp.lt.s32.totalorder %v6486, %v5515
  %v6488 = vsel %vm6487, %v6486, %v5515
  %vm6489 = vcmp.lt.s32.totalorder %v6488, %v5531
  %v6490 = vsel %vm6489, %v6488, %v5531
  %vm6491 = vcmp.lt.s32.totalorder %v6490, %v5547
  %v6492 = vsel %vm6491, %v6490, %v5547
  %vm6493 = vcmp.lt.s32.totalorder %v6492, %v5563
  %v6494 = vsel %vm6493, %v6492, %v5563
  %vm6495 = vcmp.lt.s32.totalorder %v6494, %v5579
  %v6496 = vsel %vm6495, %v6494, %v5579
  %v6497 = vrot.slane %v6496, 4
  %vm6498 = vcmp.lt.s32.totalorder %v6496, %v6497
  %v6499 = vsel %vm6498, %v6496, %v6497
  %v6500 = vrot.slane %v6499, 2
  %vm6501 = vcmp.lt.s32.totalorder %v6499, %v6500
  %v6502 = vsel %vm6501, %v6499, %v6500
  %v6503 = vrot.slane %v6502, 1
  %vm6504 = vcmp.lt.s32.totalorder %v6502, %v6503
  %v6505 = vsel %vm6504, %v6502, %v6503
  %vm6506 = vcmp.lt.s32.totalorder %v5084, %v5100
  %v6507 = vsel %vm6506, %v5084, %v5100
  %vm6508 = vcmp.lt.s32.totalorder %v6507, %v5116
  %v6509 = vsel %vm6508, %v6507, %v5116
  %vm6510 = vcmp.lt.s32.totalorder %v6509, %v5132
  %v6511 = vsel %vm6510, %v6509, %v5132
  %vm6512 = vcmp.lt.s32.totalorder %v6511, %v5148
  %v6513 = vsel %vm6512, %v6511, %v5148
  %vm6514 = vcmp.lt.s32.totalorder %v6513, %v5164
  %v6515 = vsel %vm6514, %v6513, %v5164
  %vm6516 = vcmp.lt.s32.totalorder %v6515, %v5180
  %v6517 = vsel %vm6516, %v6515, %v5180
  %vm6518 = vcmp.lt.s32.totalorder %v6517, %v5196
  %v6519 = vsel %vm6518, %v6517, %v5196
  %vm6520 = vcmp.lt.s32.totalorder %v6519, %v5212
  %v6521 = vsel %vm6520, %v6519, %v5212
  %vm6522 = vcmp.lt.s32.totalorder %v6521, %v5228
  %v6523 = vsel %vm6522, %v6521, %v5228
  %vm6524 = vcmp.lt.s32.totalorder %v6523, %v5244
  %v6525 = vsel %vm6524, %v6523, %v5244
  %vm6526 = vcmp.lt.s32.totalorder %v6525, %v5260
  %v6527 = vsel %vm6526, %v6525, %v5260
  %vm6528 = vcmp.lt.s32.totalorder %v6527, %v5276
  %v6529 = vsel %vm6528, %v6527, %v5276
  %vm6530 = vcmp.lt.s32.totalorder %v6529, %v5292
  %v6531 = vsel %vm6530, %v6529, %v5292
  %vm6532 = vcmp.lt.s32.totalorder %v6531, %v5308
  %v6533 = vsel %vm6532, %v6531, %v5308
  %vm6534 = vcmp.lt.s32.totalorder %v6533, %v5324
  %v6535 = vsel %vm6534, %v6533, %v5324
  %vm6536 = vcmp.lt.s32.totalorder %v6535, %v5340
  %v6537 = vsel %vm6536, %v6535, %v5340
  %vm6538 = vcmp.lt.s32.totalorder %v6537, %v5356
  %v6539 = vsel %vm6538, %v6537, %v5356
  %vm6540 = vcmp.lt.s32.totalorder %v6539, %v5372
  %v6541 = vsel %vm6540, %v6539, %v5372
  %vm6542 = vcmp.lt.s32.totalorder %v6541, %v5388
  %v6543 = vsel %vm6542, %v6541, %v5388
  %vm6544 = vcmp.lt.s32.totalorder %v6543, %v5404
  %v6545 = vsel %vm6544, %v6543, %v5404
  %vm6546 = vcmp.lt.s32.totalorder %v6545, %v5420
  %v6547 = vsel %vm6546, %v6545, %v5420
  %vm6548 = vcmp.lt.s32.totalorder %v6547, %v5436
  %v6549 = vsel %vm6548, %v6547, %v5436
  %vm6550 = vcmp.lt.s32.totalorder %v6549, %v5452
  %v6551 = vsel %vm6550, %v6549, %v5452
  %vm6552 = vcmp.lt.s32.totalorder %v6551, %v5468
  %v6553 = vsel %vm6552, %v6551, %v5468
  %vm6554 = vcmp.lt.s32.totalorder %v6553, %v5484
  %v6555 = vsel %vm6554, %v6553, %v5484
  %vm6556 = vcmp.lt.s32.totalorder %v6555, %v5500
  %v6557 = vsel %vm6556, %v6555, %v5500
  %vm6558 = vcmp.lt.s32.totalorder %v6557, %v5516
  %v6559 = vsel %vm6558, %v6557, %v5516
  %vm6560 = vcmp.lt.s32.totalorder %v6559, %v5532
  %v6561 = vsel %vm6560, %v6559, %v5532
  %vm6562 = vcmp.lt.s32.totalorder %v6561, %v5548
  %v6563 = vsel %vm6562, %v6561, %v5548
  %vm6564 = vcmp.lt.s32.totalorder %v6563, %v5564
  %v6565 = vsel %vm6564, %v6563, %v5564
  %vm6566 = vcmp.lt.s32.totalorder %v6565, %v5580
  %v6567 = vsel %vm6566, %v6565, %v5580
  %v6568 = vrot.slane %v6567, 4
  %vm6569 = vcmp.lt.s32.totalorder %v6567, %v6568
  %v6570 = vsel %vm6569, %v6567, %v6568
  %v6571 = vrot.slane %v6570, 2
  %vm6572 = vcmp.lt.s32.totalorder %v6570, %v6571
  %v6573 = vsel %vm6572, %v6570, %v6571
  %v6574 = vrot.slane %v6573, 1
  %vm6575 = vcmp.lt.s32.totalorder %v6573, %v6574
  %v6576 = vsel %vm6575, %v6573, %v6574
  %vm6577 = vcmp.lt.s32.totalorder %v5085, %v5101
  %v6578 = vsel %vm6577, %v5085, %v5101
  %vm6579 = vcmp.lt.s32.totalorder %v6578, %v5117
  %v6580 = vsel %vm6579, %v6578, %v5117
  %vm6581 = vcmp.lt.s32.totalorder %v6580, %v5133
  %v6582 = vsel %vm6581, %v6580, %v5133
  %vm6583 = vcmp.lt.s32.totalorder %v6582, %v5149
  %v6584 = vsel %vm6583, %v6582, %v5149
  %vm6585 = vcmp.lt.s32.totalorder %v6584, %v5165
  %v6586 = vsel %vm6585, %v6584, %v5165
  %vm6587 = vcmp.lt.s32.totalorder %v6586, %v5181
  %v6588 = vsel %vm6587, %v6586, %v5181
  %vm6589 = vcmp.lt.s32.totalorder %v6588, %v5197
  %v6590 = vsel %vm6589, %v6588, %v5197
  %vm6591 = vcmp.lt.s32.totalorder %v6590, %v5213
  %v6592 = vsel %vm6591, %v6590, %v5213
  %vm6593 = vcmp.lt.s32.totalorder %v6592, %v5229
  %v6594 = vsel %vm6593, %v6592, %v5229
  %vm6595 = vcmp.lt.s32.totalorder %v6594, %v5245
  %v6596 = vsel %vm6595, %v6594, %v5245
  %vm6597 = vcmp.lt.s32.totalorder %v6596, %v5261
  %v6598 = vsel %vm6597, %v6596, %v5261
  %vm6599 = vcmp.lt.s32.totalorder %v6598, %v5277
  %v6600 = vsel %vm6599, %v6598, %v5277
  %vm6601 = vcmp.lt.s32.totalorder %v6600, %v5293
  %v6602 = vsel %vm6601, %v6600, %v5293
  %vm6603 = vcmp.lt.s32.totalorder %v6602, %v5309
  %v6604 = vsel %vm6603, %v6602, %v5309
  %vm6605 = vcmp.lt.s32.totalorder %v6604, %v5325
  %v6606 = vsel %vm6605, %v6604, %v5325
  %vm6607 = vcmp.lt.s32.totalorder %v6606, %v5341
  %v6608 = vsel %vm6607, %v6606, %v5341
  %vm6609 = vcmp.lt.s32.totalorder %v6608, %v5357
  %v6610 = vsel %vm6609, %v6608, %v5357
  %vm6611 = vcmp.lt.s32.totalorder %v6610, %v5373
  %v6612 = vsel %vm6611, %v6610, %v5373
  %vm6613 = vcmp.lt.s32.totalorder %v6612, %v5389
  %v6614 = vsel %vm6613, %v6612, %v5389
  %vm6615 = vcmp.lt.s32.totalorder %v6614, %v5405
  %v6616 = vsel %vm6615, %v6614, %v5405
  %vm6617 = vcmp.lt.s32.totalorder %v6616, %v5421
  %v6618 = vsel %vm6617, %v6616, %v5421
  %vm6619 = vcmp.lt.s32.totalorder %v6618, %v5437
  %v6620 = vsel %vm6619, %v6618, %v5437
  %vm6621 = vcmp.lt.s32.totalorder %v6620, %v5453
  %v6622 = vsel %vm6621, %v6620, %v5453
  %vm6623 = vcmp.lt.s32.totalorder %v6622, %v5469
  %v6624 = vsel %vm6623, %v6622, %v5469
  %vm6625 = vcmp.lt.s32.totalorder %v6624, %v5485
  %v6626 = vsel %vm6625, %v6624, %v5485
  %vm6627 = vcmp.lt.s32.totalorder %v6626, %v5501
  %v6628 = vsel %vm6627, %v6626, %v5501
  %vm6629 = vcmp.lt.s32.totalorder %v6628, %v5517
  %v6630 = vsel %vm6629, %v6628, %v5517
  %vm6631 = vcmp.lt.s32.totalorder %v6630, %v5533
  %v6632 = vsel %vm6631, %v6630, %v5533
  %vm6633 = vcmp.lt.s32.totalorder %v6632, %v5549
  %v6634 = vsel %vm6633, %v6632, %v5549
  %vm6635 = vcmp.lt.s32.totalorder %v6634, %v5565
  %v6636 = vsel %vm6635, %v6634, %v5565
  %vm6637 = vcmp.lt.s32.totalorder %v6636, %v5581
  %v6638 = vsel %vm6637, %v6636, %v5581
  %v6639 = vrot.slane %v6638, 4
  %vm6640 = vcmp.lt.s32.totalorder %v6638, %v6639
  %v6641 = vsel %vm6640, %v6638, %v6639
  %v6642 = vrot.slane %v6641, 2
  %vm6643 = vcmp.lt.s32.totalorder %v6641, %v6642
  %v6644 = vsel %vm6643, %v6641, %v6642
  %v6645 = vrot.slane %v6644, 1
  %vm6646 = vcmp.lt.s32.totalorder %v6644, %v6645
  %v6647 = vsel %vm6646, %v6644, %v6645
  %vm6648 = vcmp.lt.s32.totalorder %v5086, %v5102
  %v6649 = vsel %vm6648, %v5086, %v5102
  %vm6650 = vcmp.lt.s32.totalorder %v6649, %v5118
  %v6651 = vsel %vm6650, %v6649, %v5118
  %vm6652 = vcmp.lt.s32.totalorder %v6651, %v5134
  %v6653 = vsel %vm6652, %v6651, %v5134
  %vm6654 = vcmp.lt.s32.totalorder %v6653, %v5150
  %v6655 = vsel %vm6654, %v6653, %v5150
  %vm6656 = vcmp.lt.s32.totalorder %v6655, %v5166
  %v6657 = vsel %vm6656, %v6655, %v5166
  %vm6658 = vcmp.lt.s32.totalorder %v6657, %v5182
  %v6659 = vsel %vm6658, %v6657, %v5182
  %vm6660 = vcmp.lt.s32.totalorder %v6659, %v5198
  %v6661 = vsel %vm6660, %v6659, %v5198
  %vm6662 = vcmp.lt.s32.totalorder %v6661, %v5214
  %v6663 = vsel %vm6662, %v6661, %v5214
  %vm6664 = vcmp.lt.s32.totalorder %v6663, %v5230
  %v6665 = vsel %vm6664, %v6663, %v5230
  %vm6666 = vcmp.lt.s32.totalorder %v6665, %v5246
  %v6667 = vsel %vm6666, %v6665, %v5246
  %vm6668 = vcmp.lt.s32.totalorder %v6667, %v5262
  %v6669 = vsel %vm6668, %v6667, %v5262
  %vm6670 = vcmp.lt.s32.totalorder %v6669, %v5278
  %v6671 = vsel %vm6670, %v6669, %v5278
  %vm6672 = vcmp.lt.s32.totalorder %v6671, %v5294
  %v6673 = vsel %vm6672, %v6671, %v5294
  %vm6674 = vcmp.lt.s32.totalorder %v6673, %v5310
  %v6675 = vsel %vm6674, %v6673, %v5310
  %vm6676 = vcmp.lt.s32.totalorder %v6675, %v5326
  %v6677 = vsel %vm6676, %v6675, %v5326
  %vm6678 = vcmp.lt.s32.totalorder %v6677, %v5342
  %v6679 = vsel %vm6678, %v6677, %v5342
  %vm6680 = vcmp.lt.s32.totalorder %v6679, %v5358
  %v6681 = vsel %vm6680, %v6679, %v5358
  %vm6682 = vcmp.lt.s32.totalorder %v6681, %v5374
  %v6683 = vsel %vm6682, %v6681, %v5374
  %vm6684 = vcmp.lt.s32.totalorder %v6683, %v5390
  %v6685 = vsel %vm6684, %v6683, %v5390
  %vm6686 = vcmp.lt.s32.totalorder %v6685, %v5406
  %v6687 = vsel %vm6686, %v6685, %v5406
  %vm6688 = vcmp.lt.s32.totalorder %v6687, %v5422
  %v6689 = vsel %vm6688, %v6687, %v5422
  %vm6690 = vcmp.lt.s32.totalorder %v6689, %v5438
  %v6691 = vsel %vm6690, %v6689, %v5438
  %vm6692 = vcmp.lt.s32.totalorder %v6691, %v5454
  %v6693 = vsel %vm6692, %v6691, %v5454
  %vm6694 = vcmp.lt.s32.totalorder %v6693, %v5470
  %v6695 = vsel %vm6694, %v6693, %v5470
  %vm6696 = vcmp.lt.s32.totalorder %v6695, %v5486
  %v6697 = vsel %vm6696, %v6695, %v5486
  %vm6698 = vcmp.lt.s32.totalorder %v6697, %v5502
  %v6699 = vsel %vm6698, %v6697, %v5502
  %vm6700 = vcmp.lt.s32.totalorder %v6699, %v5518
  %v6701 = vsel %vm6700, %v6699, %v5518
  %vm6702 = vcmp.lt.s32.totalorder %v6701, %v5534
  %v6703 = vsel %vm6702, %v6701, %v5534
  %vm6704 = vcmp.lt.s32.totalorder %v6703, %v5550
  %v6705 = vsel %vm6704, %v6703, %v5550
  %vm6706 = vcmp.lt.s32.totalorder %v6705, %v5566
  %v6707 = vsel %vm6706, %v6705, %v5566
  %vm6708 = vcmp.lt.s32.totalorder %v6707, %v5582
  %v6709 = vsel %vm6708, %v6707, %v5582
  %v6710 = vrot.slane %v6709, 4
  %vm6711 = vcmp.lt.s32.totalorder %v6709, %v6710
  %v6712 = vsel %vm6711, %v6709, %v6710
  %v6713 = vrot.slane %v6712, 2
  %vm6714 = vcmp.lt.s32.totalorder %v6712, %v6713
  %v6715 = vsel %vm6714, %v6712, %v6713
  %v6716 = vrot.slane %v6715, 1
  %vm6717 = vcmp.lt.s32.totalorder %v6715, %v6716
  %v6718 = vsel %vm6717, %v6715, %v6716
  %s6719 = smul.u32 0, 2048
  %v6720 = vlaneseq
  %v6721 = vand.u32 %v6720, 127
  %v6722 = vadd.s32 %v6721, 128
  %v6723 = vadd.s32 %v6721, 256
  %v6724 = vadd.s32 %v6721, 384
  %v6725 = vadd.s32 %v6721, 512
  %v6726 = vadd.s32 %v6721, 640
  %v6727 = vadd.s32 %v6721, 768
  %v6728 = vadd.s32 %v6721, 896
  %v6729 = vadd.s32 %v6721, 1024
  %v6730 = vadd.s32 %v6721, 1152
  %v6731 = vadd.s32 %v6721, 1280
  %v6732 = vadd.s32 %v6721, 1408
  %v6733 = vadd.s32 %v6721, 1536
  %v6734 = vadd.s32 %v6721, 1664
  %v6735 = vadd.s32 %v6721, 1792
  %v6736 = vadd.s32 %v6721, 1920
  %v6737 = vstv %s6719
  %v6738 = vadd.s32 %v6721, %v6737
  %v6739 = vadd.s32 %v6722, %v6737
  %v6740 = vadd.s32 %v6723, %v6737
  %v6741 = vadd.s32 %v6724, %v6737
  %v6742 = vadd.s32 %v6725, %v6737
  %v6743 = vadd.s32 %v6726, %v6737
  %v6744 = vadd.s32 %v6727, %v6737
  %v6745 = vadd.s32 %v6728, %v6737
  %v6746 = vadd.s32 %v6729, %v6737
  %v6747 = vadd.s32 %v6730, %v6737
  %v6748 = vadd.s32 %v6731, %v6737
  %v6749 = vadd.s32 %v6732, %v6737
  %v6750 = vadd.s32 %v6733, %v6737
  %v6751 = vadd.s32 %v6734, %v6737
  %v6752 = vadd.s32 %v6735, %v6737
  %v6753 = vadd.s32 %v6736, %v6737
  %vm6754 = vcmp.lt.s32.totalorder %v6738, 16
  %vm6755 = vcmp.lt.s32.totalorder %v6739, 16
  %vm6756 = vcmp.lt.s32.totalorder %v6740, 16
  %vm6757 = vcmp.lt.s32.totalorder %v6741, 16
  %vm6758 = vcmp.lt.s32.totalorder %v6742, 16
  %vm6759 = vcmp.lt.s32.totalorder %v6743, 16
  %vm6760 = vcmp.lt.s32.totalorder %v6744, 16
  %vm6761 = vcmp.lt.s32.totalorder %v6745, 16
  %vm6762 = vcmp.lt.s32.totalorder %v6746, 16
  %vm6763 = vcmp.lt.s32.totalorder %v6747, 16
  %vm6764 = vcmp.lt.s32.totalorder %v6748, 16
  %vm6765 = vcmp.lt.s32.totalorder %v6749, 16
  %vm6766 = vcmp.lt.s32.totalorder %v6750, 16
  %vm6767 = vcmp.lt.s32.totalorder %v6751, 16
  %vm6768 = vcmp.lt.s32.totalorder %v6752, 16
  %vm6769 = vcmp.lt.s32.totalorder %v6753, 16
  %v6770 = vsel %vm6754, %v5653, 256
  %v6771 = vsel %vm6755, %v5724, 256
  %v6772 = vsel %vm6756, %v5795, 256
  %v6773 = vsel %vm6757, %v5866, 256
  %v6774 = vsel %vm6758, %v5937, 256
  %v6775 = vsel %vm6759, %v6008, 256
  %v6776 = vsel %vm6760, %v6079, 256
  %v6777 = vsel %vm6761, %v6150, 256
  %v6778 = vsel %vm6762, %v6221, 256
  %v6779 = vsel %vm6763, %v6292, 256
  %v6780 = vsel %vm6764, %v6363, 256
  %v6781 = vsel %vm6765, %v6434, 256
  %v6782 = vsel %vm6766, %v6505, 256
  %v6783 = vsel %vm6767, %v6576, 256
  %v6784 = vsel %vm6768, %v6647, 256
  %v6785 = vsel %vm6769, %v6718, 256
  %v6786 = vcombine.low %v6770, %v6771
  %v6787 = vcombine.low %v6772, %v6773
  %v6788 = vcombine.low %v6774, %v6775
  %v6789 = vcombine.low %v6776, %v6777
  %v6791 = vunpack.c.l.s4 1966171168
  %v6792 = vunpack.c.0.s8 %v6791
  %v6793 = vlaneseq
  %v6794 = vshrl.u32 %v6793, 7
  %v6795 = vsub.s32 %v6792, %v6794
  %v6796 = vrot.slane %v6786, %v6795
  %v6798 = vunpack.c.l.s4 1966171168
  %v6799 = vunpack.c.0.s8 %v6798
  %v6800 = vlaneseq
  %v6801 = vshrl.u32 %v6800, 7
  %v6802 = vsub.s32 %v6799, %v6801
  %v6803 = vrot.slane %v6787, %v6802
  %v6805 = vunpack.c.l.s4 1966171168
  %v6806 = vunpack.c.0.s8 %v6805
  %v6807 = vlaneseq
  %v6808 = vshrl.u32 %v6807, 7
  %v6809 = vsub.s32 %v6806, %v6808
  %v6810 = vrot.slane %v6788, %v6809
  %v6812 = vunpack.c.l.s4 1966171168
  %v6813 = vunpack.c.0.s8 %v6812
  %v6814 = vlaneseq
  %v6815 = vshrl.u32 %v6814, 7
  %v6816 = vsub.s32 %v6813, %v6815
  %v6817 = vrot.slane %v6789, %v6816
  %v6818 = vcombine.low %v6796, %v6803
  %v6819 = vcombine.low %v6810, %v6817
  %v6821 = vunpack.c.l.s4 1966171168
  %v6822 = vunpack.c.0.s8 %v6821
  %v6823 = vlaneseq
  %v6824 = vshrl.u32 %v6823, 7
  %v6825 = vsub.s32 %v6822, %v6824
  %v6826 = vrot.slane %v6818, %v6825
  %v6828 = vunpack.c.l.s4 1966171168
  %v6829 = vunpack.c.0.s8 %v6828
  %v6830 = vlaneseq
  %v6831 = vshrl.u32 %v6830, 7
  %v6832 = vsub.s32 %v6829, %v6831
  %v6833 = vrot.slane %v6819, %v6832
  %v6834 = vcombine.low %v6826, %v6833
  %v6835 = vcombine.low %v6778, %v6779
  %v6836 = vcombine.low %v6780, %v6781
  %v6837 = vcombine.low %v6782, %v6783
  %v6838 = vcombine.low %v6784, %v6785
  %v6840 = vunpack.c.l.s4 1966171168
  %v6841 = vunpack.c.0.s8 %v6840
  %v6842 = vlaneseq
  %v6843 = vshrl.u32 %v6842, 7
  %v6844 = vsub.s32 %v6841, %v6843
  %v6845 = vrot.slane %v6835, %v6844
  %v6847 = vunpack.c.l.s4 1966171168
  %v6848 = vunpack.c.0.s8 %v6847
  %v6849 = vlaneseq
  %v6850 = vshrl.u32 %v6849, 7
  %v6851 = vsub.s32 %v6848, %v6850
  %v6852 = vrot.slane %v6836, %v6851
  %v6854 = vunpack.c.l.s4 1966171168
  %v6855 = vunpack.c.0.s8 %v6854
  %v6856 = vlaneseq
  %v6857 = vshrl.u32 %v6856, 7
  %v6858 = vsub.s32 %v6855, %v6857
  %v6859 = vrot.slane %v6837, %v6858
  %v6861 = vunpack.c.l.s4 1966171168
  %v6862 = vunpack.c.0.s8 %v6861
  %v6863 = vlaneseq
  %v6864 = vshrl.u32 %v6863, 7
  %v6865 = vsub.s32 %v6862, %v6864
  %v6866 = vrot.slane %v6838, %v6865
  %v6867 = vcombine.low %v6845, %v6852
  %v6868 = vcombine.low %v6859, %v6866
  %v6870 = vunpack.c.l.s4 1966171168
  %v6871 = vunpack.c.0.s8 %v6870
  %v6872 = vlaneseq
  %v6873 = vshrl.u32 %v6872, 7
  %v6874 = vsub.s32 %v6871, %v6873
  %v6875 = vrot.slane %v6867, %v6874
  %v6877 = vunpack.c.l.s4 1966171168
  %v6878 = vunpack.c.0.s8 %v6877
  %v6879 = vlaneseq
  %v6880 = vshrl.u32 %v6879, 7
  %v6881 = vsub.s32 %v6878, %v6880
  %v6882 = vrot.slane %v6868, %v6881
  %v6883 = vcombine.low %v6875, %v6882
  %6884 = vst [vmem:[%s5] sm:$0xff] %v6834
  %6885 = vst [vmem:[%s5 + $0x8] sm:$0xff] %v6883
  %vm6886 = vcmp.eq.s32.totalorder %v3935, %v6770
  %vm6887 = vcmp.eq.s32.totalorder %v3935, %v6771
  %vm6888 = vcmp.eq.s32.totalorder %v3935, %v6772
  %vm6889 = vcmp.eq.s32.totalorder %v3935, %v6773
  %vm6890 = vcmp.eq.s32.totalorder %v3935, %v6774
  %vm6891 = vcmp.eq.s32.totalorder %v3935, %v6775
  %vm6892 = vcmp.eq.s32.totalorder %v3935, %v6776
  %vm6893 = vcmp.eq.s32.totalorder %v3935, %v6777
  %vm6894 = vcmp.eq.s32.totalorder %v3935, %v6778
  %vm6895 = vcmp.eq.s32.totalorder %v3935, %v6779
  %vm6896 = vcmp.eq.s32.totalorder %v3935, %v6780
  %vm6897 = vcmp.eq.s32.totalorder %v3935, %v6781
  %vm6898 = vcmp.eq.s32.totalorder %v3935, %v6782
  %vm6899 = vcmp.eq.s32.totalorder %v3935, %v6783
  %vm6900 = vcmp.eq.s32.totalorder %v3935, %v6784
  %vm6901 = vcmp.eq.s32.totalorder %v3935, %v6785
  %vm6902 = vcmp.eq.s32.totalorder %v3936, %v6770
  %vm6903 = vcmp.eq.s32.totalorder %v3936, %v6771
  %vm6904 = vcmp.eq.s32.totalorder %v3936, %v6772
  %vm6905 = vcmp.eq.s32.totalorder %v3936, %v6773
  %vm6906 = vcmp.eq.s32.totalorder %v3936, %v6774
  %vm6907 = vcmp.eq.s32.totalorder %v3936, %v6775
  %vm6908 = vcmp.eq.s32.totalorder %v3936, %v6776
  %vm6909 = vcmp.eq.s32.totalorder %v3936, %v6777
  %vm6910 = vcmp.eq.s32.totalorder %v3936, %v6778
  %vm6911 = vcmp.eq.s32.totalorder %v3936, %v6779
  %vm6912 = vcmp.eq.s32.totalorder %v3936, %v6780
  %vm6913 = vcmp.eq.s32.totalorder %v3936, %v6781
  %vm6914 = vcmp.eq.s32.totalorder %v3936, %v6782
  %vm6915 = vcmp.eq.s32.totalorder %v3936, %v6783
  %vm6916 = vcmp.eq.s32.totalorder %v3936, %v6784
  %vm6917 = vcmp.eq.s32.totalorder %v3936, %v6785
  %vm6918 = vcmp.eq.s32.totalorder %v3937, %v6770
  %vm6919 = vcmp.eq.s32.totalorder %v3937, %v6771
  %vm6920 = vcmp.eq.s32.totalorder %v3937, %v6772
  %vm6921 = vcmp.eq.s32.totalorder %v3937, %v6773
  %vm6922 = vcmp.eq.s32.totalorder %v3937, %v6774
  %vm6923 = vcmp.eq.s32.totalorder %v3937, %v6775
  %vm6924 = vcmp.eq.s32.totalorder %v3937, %v6776
  %vm6925 = vcmp.eq.s32.totalorder %v3937, %v6777
  %vm6926 = vcmp.eq.s32.totalorder %v3937, %v6778
  %vm6927 = vcmp.eq.s32.totalorder %v3937, %v6779
  %vm6928 = vcmp.eq.s32.totalorder %v3937, %v6780
  %vm6929 = vcmp.eq.s32.totalorder %v3937, %v6781
  %vm6930 = vcmp.eq.s32.totalorder %v3937, %v6782
  %vm6931 = vcmp.eq.s32.totalorder %v3937, %v6783
  %vm6932 = vcmp.eq.s32.totalorder %v3937, %v6784
  %vm6933 = vcmp.eq.s32.totalorder %v3937, %v6785
  %vm6934 = vcmp.eq.s32.totalorder %v3938, %v6770
  %vm6935 = vcmp.eq.s32.totalorder %v3938, %v6771
  %vm6936 = vcmp.eq.s32.totalorder %v3938, %v6772
  %vm6937 = vcmp.eq.s32.totalorder %v3938, %v6773
  %vm6938 = vcmp.eq.s32.totalorder %v3938, %v6774
  %vm6939 = vcmp.eq.s32.totalorder %v3938, %v6775
  %vm6940 = vcmp.eq.s32.totalorder %v3938, %v6776
  %vm6941 = vcmp.eq.s32.totalorder %v3938, %v6777
  %vm6942 = vcmp.eq.s32.totalorder %v3938, %v6778
  %vm6943 = vcmp.eq.s32.totalorder %v3938, %v6779
  %vm6944 = vcmp.eq.s32.totalorder %v3938, %v6780
  %vm6945 = vcmp.eq.s32.totalorder %v3938, %v6781
  %vm6946 = vcmp.eq.s32.totalorder %v3938, %v6782
  %vm6947 = vcmp.eq.s32.totalorder %v3938, %v6783
  %vm6948 = vcmp.eq.s32.totalorder %v3938, %v6784
  %vm6949 = vcmp.eq.s32.totalorder %v3938, %v6785
  %vm6950 = vcmp.eq.s32.totalorder %v3939, %v6770
  %vm6951 = vcmp.eq.s32.totalorder %v3939, %v6771
  %vm6952 = vcmp.eq.s32.totalorder %v3939, %v6772
  %vm6953 = vcmp.eq.s32.totalorder %v3939, %v6773
  %vm6954 = vcmp.eq.s32.totalorder %v3939, %v6774
  %vm6955 = vcmp.eq.s32.totalorder %v3939, %v6775
  %vm6956 = vcmp.eq.s32.totalorder %v3939, %v6776
  %vm6957 = vcmp.eq.s32.totalorder %v3939, %v6777
  %vm6958 = vcmp.eq.s32.totalorder %v3939, %v6778
  %vm6959 = vcmp.eq.s32.totalorder %v3939, %v6779
  %vm6960 = vcmp.eq.s32.totalorder %v3939, %v6780
  %vm6961 = vcmp.eq.s32.totalorder %v3939, %v6781
  %vm6962 = vcmp.eq.s32.totalorder %v3939, %v6782
  %vm6963 = vcmp.eq.s32.totalorder %v3939, %v6783
  %vm6964 = vcmp.eq.s32.totalorder %v3939, %v6784
  %vm6965 = vcmp.eq.s32.totalorder %v3939, %v6785
  %vm6966 = vcmp.eq.s32.totalorder %v3940, %v6770
  %vm6967 = vcmp.eq.s32.totalorder %v3940, %v6771
  %vm6968 = vcmp.eq.s32.totalorder %v3940, %v6772
  %vm6969 = vcmp.eq.s32.totalorder %v3940, %v6773
  %vm6970 = vcmp.eq.s32.totalorder %v3940, %v6774
  %vm6971 = vcmp.eq.s32.totalorder %v3940, %v6775
  %vm6972 = vcmp.eq.s32.totalorder %v3940, %v6776
  %vm6973 = vcmp.eq.s32.totalorder %v3940, %v6777
  %vm6974 = vcmp.eq.s32.totalorder %v3940, %v6778
  %vm6975 = vcmp.eq.s32.totalorder %v3940, %v6779
  %vm6976 = vcmp.eq.s32.totalorder %v3940, %v6780
  %vm6977 = vcmp.eq.s32.totalorder %v3940, %v6781
  %vm6978 = vcmp.eq.s32.totalorder %v3940, %v6782
  %vm6979 = vcmp.eq.s32.totalorder %v3940, %v6783
  %vm6980 = vcmp.eq.s32.totalorder %v3940, %v6784
  %vm6981 = vcmp.eq.s32.totalorder %v3940, %v6785
  %vm6982 = vcmp.eq.s32.totalorder %v3941, %v6770
  %vm6983 = vcmp.eq.s32.totalorder %v3941, %v6771
  %vm6984 = vcmp.eq.s32.totalorder %v3941, %v6772
  %vm6985 = vcmp.eq.s32.totalorder %v3941, %v6773
  %vm6986 = vcmp.eq.s32.totalorder %v3941, %v6774
  %vm6987 = vcmp.eq.s32.totalorder %v3941, %v6775
  %vm6988 = vcmp.eq.s32.totalorder %v3941, %v6776
  %vm6989 = vcmp.eq.s32.totalorder %v3941, %v6777
  %vm6990 = vcmp.eq.s32.totalorder %v3941, %v6778
  %vm6991 = vcmp.eq.s32.totalorder %v3941, %v6779
  %vm6992 = vcmp.eq.s32.totalorder %v3941, %v6780
  %vm6993 = vcmp.eq.s32.totalorder %v3941, %v6781
  %vm6994 = vcmp.eq.s32.totalorder %v3941, %v6782
  %vm6995 = vcmp.eq.s32.totalorder %v3941, %v6783
  %vm6996 = vcmp.eq.s32.totalorder %v3941, %v6784
  %vm6997 = vcmp.eq.s32.totalorder %v3941, %v6785
  %vm6998 = vcmp.eq.s32.totalorder %v3942, %v6770
  %vm6999 = vcmp.eq.s32.totalorder %v3942, %v6771
  %vm7000 = vcmp.eq.s32.totalorder %v3942, %v6772
  %vm7001 = vcmp.eq.s32.totalorder %v3942, %v6773
  %vm7002 = vcmp.eq.s32.totalorder %v3942, %v6774
  %vm7003 = vcmp.eq.s32.totalorder %v3942, %v6775
  %vm7004 = vcmp.eq.s32.totalorder %v3942, %v6776
  %vm7005 = vcmp.eq.s32.totalorder %v3942, %v6777
  %vm7006 = vcmp.eq.s32.totalorder %v3942, %v6778
  %vm7007 = vcmp.eq.s32.totalorder %v3942, %v6779
  %vm7008 = vcmp.eq.s32.totalorder %v3942, %v6780
  %vm7009 = vcmp.eq.s32.totalorder %v3942, %v6781
  %vm7010 = vcmp.eq.s32.totalorder %v3942, %v6782
  %vm7011 = vcmp.eq.s32.totalorder %v3942, %v6783
  %vm7012 = vcmp.eq.s32.totalorder %v3942, %v6784
  %vm7013 = vcmp.eq.s32.totalorder %v3942, %v6785
  %vm7014 = vcmp.eq.s32.totalorder %v3943, %v6770
  %vm7015 = vcmp.eq.s32.totalorder %v3943, %v6771
  %vm7016 = vcmp.eq.s32.totalorder %v3943, %v6772
  %vm7017 = vcmp.eq.s32.totalorder %v3943, %v6773
  %vm7018 = vcmp.eq.s32.totalorder %v3943, %v6774
  %vm7019 = vcmp.eq.s32.totalorder %v3943, %v6775
  %vm7020 = vcmp.eq.s32.totalorder %v3943, %v6776
  %vm7021 = vcmp.eq.s32.totalorder %v3943, %v6777
  %vm7022 = vcmp.eq.s32.totalorder %v3943, %v6778
  %vm7023 = vcmp.eq.s32.totalorder %v3943, %v6779
  %vm7024 = vcmp.eq.s32.totalorder %v3943, %v6780
  %vm7025 = vcmp.eq.s32.totalorder %v3943, %v6781
  %vm7026 = vcmp.eq.s32.totalorder %v3943, %v6782
  %vm7027 = vcmp.eq.s32.totalorder %v3943, %v6783
  %vm7028 = vcmp.eq.s32.totalorder %v3943, %v6784
  %vm7029 = vcmp.eq.s32.totalorder %v3943, %v6785
  %vm7030 = vcmp.eq.s32.totalorder %v3944, %v6770
  %vm7031 = vcmp.eq.s32.totalorder %v3944, %v6771
  %vm7032 = vcmp.eq.s32.totalorder %v3944, %v6772
  %vm7033 = vcmp.eq.s32.totalorder %v3944, %v6773
  %vm7034 = vcmp.eq.s32.totalorder %v3944, %v6774
  %vm7035 = vcmp.eq.s32.totalorder %v3944, %v6775
  %vm7036 = vcmp.eq.s32.totalorder %v3944, %v6776
  %vm7037 = vcmp.eq.s32.totalorder %v3944, %v6777
  %vm7038 = vcmp.eq.s32.totalorder %v3944, %v6778
  %vm7039 = vcmp.eq.s32.totalorder %v3944, %v6779
  %vm7040 = vcmp.eq.s32.totalorder %v3944, %v6780
  %vm7041 = vcmp.eq.s32.totalorder %v3944, %v6781
  %vm7042 = vcmp.eq.s32.totalorder %v3944, %v6782
  %vm7043 = vcmp.eq.s32.totalorder %v3944, %v6783
  %vm7044 = vcmp.eq.s32.totalorder %v3944, %v6784
  %vm7045 = vcmp.eq.s32.totalorder %v3944, %v6785
  %vm7046 = vcmp.eq.s32.totalorder %v3945, %v6770
  %vm7047 = vcmp.eq.s32.totalorder %v3945, %v6771
  %vm7048 = vcmp.eq.s32.totalorder %v3945, %v6772
  %vm7049 = vcmp.eq.s32.totalorder %v3945, %v6773
  %vm7050 = vcmp.eq.s32.totalorder %v3945, %v6774
  %vm7051 = vcmp.eq.s32.totalorder %v3945, %v6775
  %vm7052 = vcmp.eq.s32.totalorder %v3945, %v6776
  %vm7053 = vcmp.eq.s32.totalorder %v3945, %v6777
  %vm7054 = vcmp.eq.s32.totalorder %v3945, %v6778
  %vm7055 = vcmp.eq.s32.totalorder %v3945, %v6779
  %vm7056 = vcmp.eq.s32.totalorder %v3945, %v6780
  %vm7057 = vcmp.eq.s32.totalorder %v3945, %v6781
  %vm7058 = vcmp.eq.s32.totalorder %v3945, %v6782
  %vm7059 = vcmp.eq.s32.totalorder %v3945, %v6783
  %vm7060 = vcmp.eq.s32.totalorder %v3945, %v6784
  %vm7061 = vcmp.eq.s32.totalorder %v3945, %v6785
  %vm7062 = vcmp.eq.s32.totalorder %v3946, %v6770
  %vm7063 = vcmp.eq.s32.totalorder %v3946, %v6771
  %vm7064 = vcmp.eq.s32.totalorder %v3946, %v6772
  %vm7065 = vcmp.eq.s32.totalorder %v3946, %v6773
  %vm7066 = vcmp.eq.s32.totalorder %v3946, %v6774
  %vm7067 = vcmp.eq.s32.totalorder %v3946, %v6775
  %vm7068 = vcmp.eq.s32.totalorder %v3946, %v6776
  %vm7069 = vcmp.eq.s32.totalorder %v3946, %v6777
  %vm7070 = vcmp.eq.s32.totalorder %v3946, %v6778
  %vm7071 = vcmp.eq.s32.totalorder %v3946, %v6779
  %vm7072 = vcmp.eq.s32.totalorder %v3946, %v6780
  %vm7073 = vcmp.eq.s32.totalorder %v3946, %v6781
  %vm7074 = vcmp.eq.s32.totalorder %v3946, %v6782
  %vm7075 = vcmp.eq.s32.totalorder %v3946, %v6783
  %vm7076 = vcmp.eq.s32.totalorder %v3946, %v6784
  %vm7077 = vcmp.eq.s32.totalorder %v3946, %v6785
  %vm7078 = vcmp.eq.s32.totalorder %v3947, %v6770
  %vm7079 = vcmp.eq.s32.totalorder %v3947, %v6771
  %vm7080 = vcmp.eq.s32.totalorder %v3947, %v6772
  %vm7081 = vcmp.eq.s32.totalorder %v3947, %v6773
  %vm7082 = vcmp.eq.s32.totalorder %v3947, %v6774
  %vm7083 = vcmp.eq.s32.totalorder %v3947, %v6775
  %vm7084 = vcmp.eq.s32.totalorder %v3947, %v6776
  %vm7085 = vcmp.eq.s32.totalorder %v3947, %v6777
  %vm7086 = vcmp.eq.s32.totalorder %v3947, %v6778
  %vm7087 = vcmp.eq.s32.totalorder %v3947, %v6779
  %vm7088 = vcmp.eq.s32.totalorder %v3947, %v6780
  %vm7089 = vcmp.eq.s32.totalorder %v3947, %v6781
  %vm7090 = vcmp.eq.s32.totalorder %v3947, %v6782
  %vm7091 = vcmp.eq.s32.totalorder %v3947, %v6783
  %vm7092 = vcmp.eq.s32.totalorder %v3947, %v6784
  %vm7093 = vcmp.eq.s32.totalorder %v3947, %v6785
  %vm7094 = vcmp.eq.s32.totalorder %v3948, %v6770
  %vm7095 = vcmp.eq.s32.totalorder %v3948, %v6771
  %vm7096 = vcmp.eq.s32.totalorder %v3948, %v6772
  %vm7097 = vcmp.eq.s32.totalorder %v3948, %v6773
  %vm7098 = vcmp.eq.s32.totalorder %v3948, %v6774
  %vm7099 = vcmp.eq.s32.totalorder %v3948, %v6775
  %vm7100 = vcmp.eq.s32.totalorder %v3948, %v6776
  %vm7101 = vcmp.eq.s32.totalorder %v3948, %v6777
  %vm7102 = vcmp.eq.s32.totalorder %v3948, %v6778
  %vm7103 = vcmp.eq.s32.totalorder %v3948, %v6779
  %vm7104 = vcmp.eq.s32.totalorder %v3948, %v6780
  %vm7105 = vcmp.eq.s32.totalorder %v3948, %v6781
  %vm7106 = vcmp.eq.s32.totalorder %v3948, %v6782
  %vm7107 = vcmp.eq.s32.totalorder %v3948, %v6783
  %vm7108 = vcmp.eq.s32.totalorder %v3948, %v6784
  %vm7109 = vcmp.eq.s32.totalorder %v3948, %v6785
  %vm7110 = vcmp.eq.s32.totalorder %v3949, %v6770
  %vm7111 = vcmp.eq.s32.totalorder %v3949, %v6771
  %vm7112 = vcmp.eq.s32.totalorder %v3949, %v6772
  %vm7113 = vcmp.eq.s32.totalorder %v3949, %v6773
  %vm7114 = vcmp.eq.s32.totalorder %v3949, %v6774
  %vm7115 = vcmp.eq.s32.totalorder %v3949, %v6775
  %vm7116 = vcmp.eq.s32.totalorder %v3949, %v6776
  %vm7117 = vcmp.eq.s32.totalorder %v3949, %v6777
  %vm7118 = vcmp.eq.s32.totalorder %v3949, %v6778
  %vm7119 = vcmp.eq.s32.totalorder %v3949, %v6779
  %vm7120 = vcmp.eq.s32.totalorder %v3949, %v6780
  %vm7121 = vcmp.eq.s32.totalorder %v3949, %v6781
  %vm7122 = vcmp.eq.s32.totalorder %v3949, %v6782
  %vm7123 = vcmp.eq.s32.totalorder %v3949, %v6783
  %vm7124 = vcmp.eq.s32.totalorder %v3949, %v6784
  %vm7125 = vcmp.eq.s32.totalorder %v3949, %v6785
  %vm7126 = vcmp.eq.s32.totalorder %v3950, %v6770
  %vm7127 = vcmp.eq.s32.totalorder %v3950, %v6771
  %vm7128 = vcmp.eq.s32.totalorder %v3950, %v6772
  %vm7129 = vcmp.eq.s32.totalorder %v3950, %v6773
  %vm7130 = vcmp.eq.s32.totalorder %v3950, %v6774
  %vm7131 = vcmp.eq.s32.totalorder %v3950, %v6775
  %vm7132 = vcmp.eq.s32.totalorder %v3950, %v6776
  %vm7133 = vcmp.eq.s32.totalorder %v3950, %v6777
  %vm7134 = vcmp.eq.s32.totalorder %v3950, %v6778
  %vm7135 = vcmp.eq.s32.totalorder %v3950, %v6779
  %vm7136 = vcmp.eq.s32.totalorder %v3950, %v6780
  %vm7137 = vcmp.eq.s32.totalorder %v3950, %v6781
  %vm7138 = vcmp.eq.s32.totalorder %v3950, %v6782
  %vm7139 = vcmp.eq.s32.totalorder %v3950, %v6783
  %vm7140 = vcmp.eq.s32.totalorder %v3950, %v6784
  %vm7141 = vcmp.eq.s32.totalorder %v3950, %v6785
  %vm7142 = vcmp.eq.s32.totalorder %v3951, %v6770
  %vm7143 = vcmp.eq.s32.totalorder %v3951, %v6771
  %vm7144 = vcmp.eq.s32.totalorder %v3951, %v6772
  %vm7145 = vcmp.eq.s32.totalorder %v3951, %v6773
  %vm7146 = vcmp.eq.s32.totalorder %v3951, %v6774
  %vm7147 = vcmp.eq.s32.totalorder %v3951, %v6775
  %vm7148 = vcmp.eq.s32.totalorder %v3951, %v6776
  %vm7149 = vcmp.eq.s32.totalorder %v3951, %v6777
  %vm7150 = vcmp.eq.s32.totalorder %v3951, %v6778
  %vm7151 = vcmp.eq.s32.totalorder %v3951, %v6779
  %vm7152 = vcmp.eq.s32.totalorder %v3951, %v6780
  %vm7153 = vcmp.eq.s32.totalorder %v3951, %v6781
  %vm7154 = vcmp.eq.s32.totalorder %v3951, %v6782
  %vm7155 = vcmp.eq.s32.totalorder %v3951, %v6783
  %vm7156 = vcmp.eq.s32.totalorder %v3951, %v6784
  %vm7157 = vcmp.eq.s32.totalorder %v3951, %v6785
  %vm7158 = vcmp.eq.s32.totalorder %v3952, %v6770
  %vm7159 = vcmp.eq.s32.totalorder %v3952, %v6771
  %vm7160 = vcmp.eq.s32.totalorder %v3952, %v6772
  %vm7161 = vcmp.eq.s32.totalorder %v3952, %v6773
  %vm7162 = vcmp.eq.s32.totalorder %v3952, %v6774
  %vm7163 = vcmp.eq.s32.totalorder %v3952, %v6775
  %vm7164 = vcmp.eq.s32.totalorder %v3952, %v6776
  %vm7165 = vcmp.eq.s32.totalorder %v3952, %v6777
  %vm7166 = vcmp.eq.s32.totalorder %v3952, %v6778
  %vm7167 = vcmp.eq.s32.totalorder %v3952, %v6779
  %vm7168 = vcmp.eq.s32.totalorder %v3952, %v6780
  %vm7169 = vcmp.eq.s32.totalorder %v3952, %v6781
  %vm7170 = vcmp.eq.s32.totalorder %v3952, %v6782
  %vm7171 = vcmp.eq.s32.totalorder %v3952, %v6783
  %vm7172 = vcmp.eq.s32.totalorder %v3952, %v6784
  %vm7173 = vcmp.eq.s32.totalorder %v3952, %v6785
  %vm7174 = vcmp.eq.s32.totalorder %v3953, %v6770
  %vm7175 = vcmp.eq.s32.totalorder %v3953, %v6771
  %vm7176 = vcmp.eq.s32.totalorder %v3953, %v6772
  %vm7177 = vcmp.eq.s32.totalorder %v3953, %v6773
  %vm7178 = vcmp.eq.s32.totalorder %v3953, %v6774
  %vm7179 = vcmp.eq.s32.totalorder %v3953, %v6775
  %vm7180 = vcmp.eq.s32.totalorder %v3953, %v6776
  %vm7181 = vcmp.eq.s32.totalorder %v3953, %v6777
  %vm7182 = vcmp.eq.s32.totalorder %v3953, %v6778
  %vm7183 = vcmp.eq.s32.totalorder %v3953, %v6779
  %vm7184 = vcmp.eq.s32.totalorder %v3953, %v6780
  %vm7185 = vcmp.eq.s32.totalorder %v3953, %v6781
  %vm7186 = vcmp.eq.s32.totalorder %v3953, %v6782
  %vm7187 = vcmp.eq.s32.totalorder %v3953, %v6783
  %vm7188 = vcmp.eq.s32.totalorder %v3953, %v6784
  %vm7189 = vcmp.eq.s32.totalorder %v3953, %v6785
  %vm7190 = vcmp.eq.s32.totalorder %v3954, %v6770
  %vm7191 = vcmp.eq.s32.totalorder %v3954, %v6771
  %vm7192 = vcmp.eq.s32.totalorder %v3954, %v6772
  %vm7193 = vcmp.eq.s32.totalorder %v3954, %v6773
  %vm7194 = vcmp.eq.s32.totalorder %v3954, %v6774
  %vm7195 = vcmp.eq.s32.totalorder %v3954, %v6775
  %vm7196 = vcmp.eq.s32.totalorder %v3954, %v6776
  %vm7197 = vcmp.eq.s32.totalorder %v3954, %v6777
  %vm7198 = vcmp.eq.s32.totalorder %v3954, %v6778
  %vm7199 = vcmp.eq.s32.totalorder %v3954, %v6779
  %vm7200 = vcmp.eq.s32.totalorder %v3954, %v6780
  %vm7201 = vcmp.eq.s32.totalorder %v3954, %v6781
  %vm7202 = vcmp.eq.s32.totalorder %v3954, %v6782
  %vm7203 = vcmp.eq.s32.totalorder %v3954, %v6783
  %vm7204 = vcmp.eq.s32.totalorder %v3954, %v6784
  %vm7205 = vcmp.eq.s32.totalorder %v3954, %v6785
  %vm7206 = vcmp.eq.s32.totalorder %v3955, %v6770
  %vm7207 = vcmp.eq.s32.totalorder %v3955, %v6771
  %vm7208 = vcmp.eq.s32.totalorder %v3955, %v6772
  %vm7209 = vcmp.eq.s32.totalorder %v3955, %v6773
  %vm7210 = vcmp.eq.s32.totalorder %v3955, %v6774
  %vm7211 = vcmp.eq.s32.totalorder %v3955, %v6775
  %vm7212 = vcmp.eq.s32.totalorder %v3955, %v6776
  %vm7213 = vcmp.eq.s32.totalorder %v3955, %v6777
  %vm7214 = vcmp.eq.s32.totalorder %v3955, %v6778
  %vm7215 = vcmp.eq.s32.totalorder %v3955, %v6779
  %vm7216 = vcmp.eq.s32.totalorder %v3955, %v6780
  %vm7217 = vcmp.eq.s32.totalorder %v3955, %v6781
  %vm7218 = vcmp.eq.s32.totalorder %v3955, %v6782
  %vm7219 = vcmp.eq.s32.totalorder %v3955, %v6783
  %vm7220 = vcmp.eq.s32.totalorder %v3955, %v6784
  %vm7221 = vcmp.eq.s32.totalorder %v3955, %v6785
  %vm7222 = vcmp.eq.s32.totalorder %v3956, %v6770
  %vm7223 = vcmp.eq.s32.totalorder %v3956, %v6771
  %vm7224 = vcmp.eq.s32.totalorder %v3956, %v6772
  %vm7225 = vcmp.eq.s32.totalorder %v3956, %v6773
  %vm7226 = vcmp.eq.s32.totalorder %v3956, %v6774
  %vm7227 = vcmp.eq.s32.totalorder %v3956, %v6775
  %vm7228 = vcmp.eq.s32.totalorder %v3956, %v6776
  %vm7229 = vcmp.eq.s32.totalorder %v3956, %v6777
  %vm7230 = vcmp.eq.s32.totalorder %v3956, %v6778
  %vm7231 = vcmp.eq.s32.totalorder %v3956, %v6779
  %vm7232 = vcmp.eq.s32.totalorder %v3956, %v6780
  %vm7233 = vcmp.eq.s32.totalorder %v3956, %v6781
  %vm7234 = vcmp.eq.s32.totalorder %v3956, %v6782
  %vm7235 = vcmp.eq.s32.totalorder %v3956, %v6783
  %vm7236 = vcmp.eq.s32.totalorder %v3956, %v6784
  %vm7237 = vcmp.eq.s32.totalorder %v3956, %v6785
  %vm7238 = vcmp.eq.s32.totalorder %v3957, %v6770
  %vm7239 = vcmp.eq.s32.totalorder %v3957, %v6771
  %vm7240 = vcmp.eq.s32.totalorder %v3957, %v6772
  %vm7241 = vcmp.eq.s32.totalorder %v3957, %v6773
  %vm7242 = vcmp.eq.s32.totalorder %v3957, %v6774
  %vm7243 = vcmp.eq.s32.totalorder %v3957, %v6775
  %vm7244 = vcmp.eq.s32.totalorder %v3957, %v6776
  %vm7245 = vcmp.eq.s32.totalorder %v3957, %v6777
  %vm7246 = vcmp.eq.s32.totalorder %v3957, %v6778
  %vm7247 = vcmp.eq.s32.totalorder %v3957, %v6779
  %vm7248 = vcmp.eq.s32.totalorder %v3957, %v6780
  %vm7249 = vcmp.eq.s32.totalorder %v3957, %v6781
  %vm7250 = vcmp.eq.s32.totalorder %v3957, %v6782
  %vm7251 = vcmp.eq.s32.totalorder %v3957, %v6783
  %vm7252 = vcmp.eq.s32.totalorder %v3957, %v6784
  %vm7253 = vcmp.eq.s32.totalorder %v3957, %v6785
  %vm7254 = vcmp.eq.s32.totalorder %v3958, %v6770
  %vm7255 = vcmp.eq.s32.totalorder %v3958, %v6771
  %vm7256 = vcmp.eq.s32.totalorder %v3958, %v6772
  %vm7257 = vcmp.eq.s32.totalorder %v3958, %v6773
  %vm7258 = vcmp.eq.s32.totalorder %v3958, %v6774
  %vm7259 = vcmp.eq.s32.totalorder %v3958, %v6775
  %vm7260 = vcmp.eq.s32.totalorder %v3958, %v6776
  %vm7261 = vcmp.eq.s32.totalorder %v3958, %v6777
  %vm7262 = vcmp.eq.s32.totalorder %v3958, %v6778
  %vm7263 = vcmp.eq.s32.totalorder %v3958, %v6779
  %vm7264 = vcmp.eq.s32.totalorder %v3958, %v6780
  %vm7265 = vcmp.eq.s32.totalorder %v3958, %v6781
  %vm7266 = vcmp.eq.s32.totalorder %v3958, %v6782
  %vm7267 = vcmp.eq.s32.totalorder %v3958, %v6783
  %vm7268 = vcmp.eq.s32.totalorder %v3958, %v6784
  %vm7269 = vcmp.eq.s32.totalorder %v3958, %v6785
  %vm7270 = vcmp.eq.s32.totalorder %v3959, %v6770
  %vm7271 = vcmp.eq.s32.totalorder %v3959, %v6771
  %vm7272 = vcmp.eq.s32.totalorder %v3959, %v6772
  %vm7273 = vcmp.eq.s32.totalorder %v3959, %v6773
  %vm7274 = vcmp.eq.s32.totalorder %v3959, %v6774
  %vm7275 = vcmp.eq.s32.totalorder %v3959, %v6775
  %vm7276 = vcmp.eq.s32.totalorder %v3959, %v6776
  %vm7277 = vcmp.eq.s32.totalorder %v3959, %v6777
  %vm7278 = vcmp.eq.s32.totalorder %v3959, %v6778
  %vm7279 = vcmp.eq.s32.totalorder %v3959, %v6779
  %vm7280 = vcmp.eq.s32.totalorder %v3959, %v6780
  %vm7281 = vcmp.eq.s32.totalorder %v3959, %v6781
  %vm7282 = vcmp.eq.s32.totalorder %v3959, %v6782
  %vm7283 = vcmp.eq.s32.totalorder %v3959, %v6783
  %vm7284 = vcmp.eq.s32.totalorder %v3959, %v6784
  %vm7285 = vcmp.eq.s32.totalorder %v3959, %v6785
  %vm7286 = vcmp.eq.s32.totalorder %v3960, %v6770
  %vm7287 = vcmp.eq.s32.totalorder %v3960, %v6771
  %vm7288 = vcmp.eq.s32.totalorder %v3960, %v6772
  %vm7289 = vcmp.eq.s32.totalorder %v3960, %v6773
  %vm7290 = vcmp.eq.s32.totalorder %v3960, %v6774
  %vm7291 = vcmp.eq.s32.totalorder %v3960, %v6775
  %vm7292 = vcmp.eq.s32.totalorder %v3960, %v6776
  %vm7293 = vcmp.eq.s32.totalorder %v3960, %v6777
  %vm7294 = vcmp.eq.s32.totalorder %v3960, %v6778
  %vm7295 = vcmp.eq.s32.totalorder %v3960, %v6779
  %vm7296 = vcmp.eq.s32.totalorder %v3960, %v6780
  %vm7297 = vcmp.eq.s32.totalorder %v3960, %v6781
  %vm7298 = vcmp.eq.s32.totalorder %v3960, %v6782
  %vm7299 = vcmp.eq.s32.totalorder %v3960, %v6783
  %vm7300 = vcmp.eq.s32.totalorder %v3960, %v6784
  %vm7301 = vcmp.eq.s32.totalorder %v3960, %v6785
  %vm7302 = vcmp.eq.s32.totalorder %v3961, %v6770
  %vm7303 = vcmp.eq.s32.totalorder %v3961, %v6771
  %vm7304 = vcmp.eq.s32.totalorder %v3961, %v6772
  %vm7305 = vcmp.eq.s32.totalorder %v3961, %v6773
  %vm7306 = vcmp.eq.s32.totalorder %v3961, %v6774
  %vm7307 = vcmp.eq.s32.totalorder %v3961, %v6775
  %vm7308 = vcmp.eq.s32.totalorder %v3961, %v6776
  %vm7309 = vcmp.eq.s32.totalorder %v3961, %v6777
  %vm7310 = vcmp.eq.s32.totalorder %v3961, %v6778
  %vm7311 = vcmp.eq.s32.totalorder %v3961, %v6779
  %vm7312 = vcmp.eq.s32.totalorder %v3961, %v6780
  %vm7313 = vcmp.eq.s32.totalorder %v3961, %v6781
  %vm7314 = vcmp.eq.s32.totalorder %v3961, %v6782
  %vm7315 = vcmp.eq.s32.totalorder %v3961, %v6783
  %vm7316 = vcmp.eq.s32.totalorder %v3961, %v6784
  %vm7317 = vcmp.eq.s32.totalorder %v3961, %v6785
  %vm7318 = vcmp.eq.s32.totalorder %v3962, %v6770
  %vm7319 = vcmp.eq.s32.totalorder %v3962, %v6771
  %vm7320 = vcmp.eq.s32.totalorder %v3962, %v6772
  %vm7321 = vcmp.eq.s32.totalorder %v3962, %v6773
  %vm7322 = vcmp.eq.s32.totalorder %v3962, %v6774
  %vm7323 = vcmp.eq.s32.totalorder %v3962, %v6775
  %vm7324 = vcmp.eq.s32.totalorder %v3962, %v6776
  %vm7325 = vcmp.eq.s32.totalorder %v3962, %v6777
  %vm7326 = vcmp.eq.s32.totalorder %v3962, %v6778
  %vm7327 = vcmp.eq.s32.totalorder %v3962, %v6779
  %vm7328 = vcmp.eq.s32.totalorder %v3962, %v6780
  %vm7329 = vcmp.eq.s32.totalorder %v3962, %v6781
  %vm7330 = vcmp.eq.s32.totalorder %v3962, %v6782
  %vm7331 = vcmp.eq.s32.totalorder %v3962, %v6783
  %vm7332 = vcmp.eq.s32.totalorder %v3962, %v6784
  %vm7333 = vcmp.eq.s32.totalorder %v3962, %v6785
  %vm7334 = vcmp.eq.s32.totalorder %v3963, %v6770
  %vm7335 = vcmp.eq.s32.totalorder %v3963, %v6771
  %vm7336 = vcmp.eq.s32.totalorder %v3963, %v6772
  %vm7337 = vcmp.eq.s32.totalorder %v3963, %v6773
  %vm7338 = vcmp.eq.s32.totalorder %v3963, %v6774
  %vm7339 = vcmp.eq.s32.totalorder %v3963, %v6775
  %vm7340 = vcmp.eq.s32.totalorder %v3963, %v6776
  %vm7341 = vcmp.eq.s32.totalorder %v3963, %v6777
  %vm7342 = vcmp.eq.s32.totalorder %v3963, %v6778
  %vm7343 = vcmp.eq.s32.totalorder %v3963, %v6779
  %vm7344 = vcmp.eq.s32.totalorder %v3963, %v6780
  %vm7345 = vcmp.eq.s32.totalorder %v3963, %v6781
  %vm7346 = vcmp.eq.s32.totalorder %v3963, %v6782
  %vm7347 = vcmp.eq.s32.totalorder %v3963, %v6783
  %vm7348 = vcmp.eq.s32.totalorder %v3963, %v6784
  %vm7349 = vcmp.eq.s32.totalorder %v3963, %v6785
  %vm7350 = vcmp.eq.s32.totalorder %v3964, %v6770
  %vm7351 = vcmp.eq.s32.totalorder %v3964, %v6771
  %vm7352 = vcmp.eq.s32.totalorder %v3964, %v6772
  %vm7353 = vcmp.eq.s32.totalorder %v3964, %v6773
  %vm7354 = vcmp.eq.s32.totalorder %v3964, %v6774
  %vm7355 = vcmp.eq.s32.totalorder %v3964, %v6775
  %vm7356 = vcmp.eq.s32.totalorder %v3964, %v6776
  %vm7357 = vcmp.eq.s32.totalorder %v3964, %v6777
  %vm7358 = vcmp.eq.s32.totalorder %v3964, %v6778
  %vm7359 = vcmp.eq.s32.totalorder %v3964, %v6779
  %vm7360 = vcmp.eq.s32.totalorder %v3964, %v6780
  %vm7361 = vcmp.eq.s32.totalorder %v3964, %v6781
  %vm7362 = vcmp.eq.s32.totalorder %v3964, %v6782
  %vm7363 = vcmp.eq.s32.totalorder %v3964, %v6783
  %vm7364 = vcmp.eq.s32.totalorder %v3964, %v6784
  %vm7365 = vcmp.eq.s32.totalorder %v3964, %v6785
  %vm7366 = vcmp.eq.s32.totalorder %v3965, %v6770
  %vm7367 = vcmp.eq.s32.totalorder %v3965, %v6771
  %vm7368 = vcmp.eq.s32.totalorder %v3965, %v6772
  %vm7369 = vcmp.eq.s32.totalorder %v3965, %v6773
  %vm7370 = vcmp.eq.s32.totalorder %v3965, %v6774
  %vm7371 = vcmp.eq.s32.totalorder %v3965, %v6775
  %vm7372 = vcmp.eq.s32.totalorder %v3965, %v6776
  %vm7373 = vcmp.eq.s32.totalorder %v3965, %v6777
  %vm7374 = vcmp.eq.s32.totalorder %v3965, %v6778
  %vm7375 = vcmp.eq.s32.totalorder %v3965, %v6779
  %vm7376 = vcmp.eq.s32.totalorder %v3965, %v6780
  %vm7377 = vcmp.eq.s32.totalorder %v3965, %v6781
  %vm7378 = vcmp.eq.s32.totalorder %v3965, %v6782
  %vm7379 = vcmp.eq.s32.totalorder %v3965, %v6783
  %vm7380 = vcmp.eq.s32.totalorder %v3965, %v6784
  %vm7381 = vcmp.eq.s32.totalorder %v3965, %v6785
  %vm7382 = vcmp.eq.s32.totalorder %v3966, %v6770
  %vm7383 = vcmp.eq.s32.totalorder %v3966, %v6771
  %vm7384 = vcmp.eq.s32.totalorder %v3966, %v6772
  %vm7385 = vcmp.eq.s32.totalorder %v3966, %v6773
  %vm7386 = vcmp.eq.s32.totalorder %v3966, %v6774
  %vm7387 = vcmp.eq.s32.totalorder %v3966, %v6775
  %vm7388 = vcmp.eq.s32.totalorder %v3966, %v6776
  %vm7389 = vcmp.eq.s32.totalorder %v3966, %v6777
  %vm7390 = vcmp.eq.s32.totalorder %v3966, %v6778
  %vm7391 = vcmp.eq.s32.totalorder %v3966, %v6779
  %vm7392 = vcmp.eq.s32.totalorder %v3966, %v6780
  %vm7393 = vcmp.eq.s32.totalorder %v3966, %v6781
  %vm7394 = vcmp.eq.s32.totalorder %v3966, %v6782
  %vm7395 = vcmp.eq.s32.totalorder %v3966, %v6783
  %vm7396 = vcmp.eq.s32.totalorder %v3966, %v6784
  %vm7397 = vcmp.eq.s32.totalorder %v3966, %v6785
  %v7398 = vsel %vm6886, 1, 0
  %v7399 = vsel %vm6887, 1, 0
  %v7400 = vsel %vm6888, 1, 0
  %v7401 = vsel %vm6889, 1, 0
  %v7402 = vsel %vm6890, 1, 0
  %v7403 = vsel %vm6891, 1, 0
  %v7404 = vsel %vm6892, 1, 0
  %v7405 = vsel %vm6893, 1, 0
  %v7406 = vsel %vm6894, 1, 0
  %v7407 = vsel %vm6895, 1, 0
  %v7408 = vsel %vm6896, 1, 0
  %v7409 = vsel %vm6897, 1, 0
  %v7410 = vsel %vm6898, 1, 0
  %v7411 = vsel %vm6899, 1, 0
  %v7412 = vsel %vm6900, 1, 0
  %v7413 = vsel %vm6901, 1, 0
  %v7414 = vsel %vm6902, 1, 0
  %v7415 = vsel %vm6903, 1, 0
  %v7416 = vsel %vm6904, 1, 0
  %v7417 = vsel %vm6905, 1, 0
  %v7418 = vsel %vm6906, 1, 0
  %v7419 = vsel %vm6907, 1, 0
  %v7420 = vsel %vm6908, 1, 0
  %v7421 = vsel %vm6909, 1, 0
  %v7422 = vsel %vm6910, 1, 0
  %v7423 = vsel %vm6911, 1, 0
  %v7424 = vsel %vm6912, 1, 0
  %v7425 = vsel %vm6913, 1, 0
  %v7426 = vsel %vm6914, 1, 0
  %v7427 = vsel %vm6915, 1, 0
  %v7428 = vsel %vm6916, 1, 0
  %v7429 = vsel %vm6917, 1, 0
  %v7430 = vsel %vm6918, 1, 0
  %v7431 = vsel %vm6919, 1, 0
  %v7432 = vsel %vm6920, 1, 0
  %v7433 = vsel %vm6921, 1, 0
  %v7434 = vsel %vm6922, 1, 0
  %v7435 = vsel %vm6923, 1, 0
  %v7436 = vsel %vm6924, 1, 0
  %v7437 = vsel %vm6925, 1, 0
  %v7438 = vsel %vm6926, 1, 0
  %v7439 = vsel %vm6927, 1, 0
  %v7440 = vsel %vm6928, 1, 0
  %v7441 = vsel %vm6929, 1, 0
  %v7442 = vsel %vm6930, 1, 0
  %v7443 = vsel %vm6931, 1, 0
  %v7444 = vsel %vm6932, 1, 0
  %v7445 = vsel %vm6933, 1, 0
  %v7446 = vsel %vm6934, 1, 0
  %v7447 = vsel %vm6935, 1, 0
  %v7448 = vsel %vm6936, 1, 0
  %v7449 = vsel %vm6937, 1, 0
  %v7450 = vsel %vm6938, 1, 0
  %v7451 = vsel %vm6939, 1, 0
  %v7452 = vsel %vm6940, 1, 0
  %v7453 = vsel %vm6941, 1, 0
  %v7454 = vsel %vm6942, 1, 0
  %v7455 = vsel %vm6943, 1, 0
  %v7456 = vsel %vm6944, 1, 0
  %v7457 = vsel %vm6945, 1, 0
  %v7458 = vsel %vm6946, 1, 0
  %v7459 = vsel %vm6947, 1, 0
  %v7460 = vsel %vm6948, 1, 0
  %v7461 = vsel %vm6949, 1, 0
  %v7462 = vsel %vm6950, 1, 0
  %v7463 = vsel %vm6951, 1, 0
  %v7464 = vsel %vm6952, 1, 0
  %v7465 = vsel %vm6953, 1, 0
  %v7466 = vsel %vm6954, 1, 0
  %v7467 = vsel %vm6955, 1, 0
  %v7468 = vsel %vm6956, 1, 0
  %v7469 = vsel %vm6957, 1, 0
  %v7470 = vsel %vm6958, 1, 0
  %v7471 = vsel %vm6959, 1, 0
  %v7472 = vsel %vm6960, 1, 0
  %v7473 = vsel %vm6961, 1, 0
  %v7474 = vsel %vm6962, 1, 0
  %v7475 = vsel %vm6963, 1, 0
  %v7476 = vsel %vm6964, 1, 0
  %v7477 = vsel %vm6965, 1, 0
  %v7478 = vsel %vm6966, 1, 0
  %v7479 = vsel %vm6967, 1, 0
  %v7480 = vsel %vm6968, 1, 0
  %v7481 = vsel %vm6969, 1, 0
  %v7482 = vsel %vm6970, 1, 0
  %v7483 = vsel %vm6971, 1, 0
  %v7484 = vsel %vm6972, 1, 0
  %v7485 = vsel %vm6973, 1, 0
  %v7486 = vsel %vm6974, 1, 0
  %v7487 = vsel %vm6975, 1, 0
  %v7488 = vsel %vm6976, 1, 0
  %v7489 = vsel %vm6977, 1, 0
  %v7490 = vsel %vm6978, 1, 0
  %v7491 = vsel %vm6979, 1, 0
  %v7492 = vsel %vm6980, 1, 0
  %v7493 = vsel %vm6981, 1, 0
  %v7494 = vsel %vm6982, 1, 0
  %v7495 = vsel %vm6983, 1, 0
  %v7496 = vsel %vm6984, 1, 0
  %v7497 = vsel %vm6985, 1, 0
  %v7498 = vsel %vm6986, 1, 0
  %v7499 = vsel %vm6987, 1, 0
  %v7500 = vsel %vm6988, 1, 0
  %v7501 = vsel %vm6989, 1, 0
  %v7502 = vsel %vm6990, 1, 0
  %v7503 = vsel %vm6991, 1, 0
  %v7504 = vsel %vm6992, 1, 0
  %v7505 = vsel %vm6993, 1, 0
  %v7506 = vsel %vm6994, 1, 0
  %v7507 = vsel %vm6995, 1, 0
  %v7508 = vsel %vm6996, 1, 0
  %v7509 = vsel %vm6997, 1, 0
  %v7510 = vsel %vm6998, 1, 0
  %v7511 = vsel %vm6999, 1, 0
  %v7512 = vsel %vm7000, 1, 0
  %v7513 = vsel %vm7001, 1, 0
  %v7514 = vsel %vm7002, 1, 0
  %v7515 = vsel %vm7003, 1, 0
  %v7516 = vsel %vm7004, 1, 0
  %v7517 = vsel %vm7005, 1, 0
  %v7518 = vsel %vm7006, 1, 0
  %v7519 = vsel %vm7007, 1, 0
  %v7520 = vsel %vm7008, 1, 0
  %v7521 = vsel %vm7009, 1, 0
  %v7522 = vsel %vm7010, 1, 0
  %v7523 = vsel %vm7011, 1, 0
  %v7524 = vsel %vm7012, 1, 0
  %v7525 = vsel %vm7013, 1, 0
  %v7526 = vsel %vm7014, 1, 0
  %v7527 = vsel %vm7015, 1, 0
  %v7528 = vsel %vm7016, 1, 0
  %v7529 = vsel %vm7017, 1, 0
  %v7530 = vsel %vm7018, 1, 0
  %v7531 = vsel %vm7019, 1, 0
  %v7532 = vsel %vm7020, 1, 0
  %v7533 = vsel %vm7021, 1, 0
  %v7534 = vsel %vm7022, 1, 0
  %v7535 = vsel %vm7023, 1, 0
  %v7536 = vsel %vm7024, 1, 0
  %v7537 = vsel %vm7025, 1, 0
  %v7538 = vsel %vm7026, 1, 0
  %v7539 = vsel %vm7027, 1, 0
  %v7540 = vsel %vm7028, 1, 0
  %v7541 = vsel %vm7029, 1, 0
  %v7542 = vsel %vm7030, 1, 0
  %v7543 = vsel %vm7031, 1, 0
  %v7544 = vsel %vm7032, 1, 0
  %v7545 = vsel %vm7033, 1, 0
  %v7546 = vsel %vm7034, 1, 0
  %v7547 = vsel %vm7035, 1, 0
  %v7548 = vsel %vm7036, 1, 0
  %v7549 = vsel %vm7037, 1, 0
  %v7550 = vsel %vm7038, 1, 0
  %v7551 = vsel %vm7039, 1, 0
  %v7552 = vsel %vm7040, 1, 0
  %v7553 = vsel %vm7041, 1, 0
  %v7554 = vsel %vm7042, 1, 0
  %v7555 = vsel %vm7043, 1, 0
  %v7556 = vsel %vm7044, 1, 0
  %v7557 = vsel %vm7045, 1, 0
  %v7558 = vsel %vm7046, 1, 0
  %v7559 = vsel %vm7047, 1, 0
  %v7560 = vsel %vm7048, 1, 0
  %v7561 = vsel %vm7049, 1, 0
  %v7562 = vsel %vm7050, 1, 0
  %v7563 = vsel %vm7051, 1, 0
  %v7564 = vsel %vm7052, 1, 0
  %v7565 = vsel %vm7053, 1, 0
  %v7566 = vsel %vm7054, 1, 0
  %v7567 = vsel %vm7055, 1, 0
  %v7568 = vsel %vm7056, 1, 0
  %v7569 = vsel %vm7057, 1, 0
  %v7570 = vsel %vm7058, 1, 0
  %v7571 = vsel %vm7059, 1, 0
  %v7572 = vsel %vm7060, 1, 0
  %v7573 = vsel %vm7061, 1, 0
  %v7574 = vsel %vm7062, 1, 0
  %v7575 = vsel %vm7063, 1, 0
  %v7576 = vsel %vm7064, 1, 0
  %v7577 = vsel %vm7065, 1, 0
  %v7578 = vsel %vm7066, 1, 0
  %v7579 = vsel %vm7067, 1, 0
  %v7580 = vsel %vm7068, 1, 0
  %v7581 = vsel %vm7069, 1, 0
  %v7582 = vsel %vm7070, 1, 0
  %v7583 = vsel %vm7071, 1, 0
  %v7584 = vsel %vm7072, 1, 0
  %v7585 = vsel %vm7073, 1, 0
  %v7586 = vsel %vm7074, 1, 0
  %v7587 = vsel %vm7075, 1, 0
  %v7588 = vsel %vm7076, 1, 0
  %v7589 = vsel %vm7077, 1, 0
  %v7590 = vsel %vm7078, 1, 0
  %v7591 = vsel %vm7079, 1, 0
  %v7592 = vsel %vm7080, 1, 0
  %v7593 = vsel %vm7081, 1, 0
  %v7594 = vsel %vm7082, 1, 0
  %v7595 = vsel %vm7083, 1, 0
  %v7596 = vsel %vm7084, 1, 0
  %v7597 = vsel %vm7085, 1, 0
  %v7598 = vsel %vm7086, 1, 0
  %v7599 = vsel %vm7087, 1, 0
  %v7600 = vsel %vm7088, 1, 0
  %v7601 = vsel %vm7089, 1, 0
  %v7602 = vsel %vm7090, 1, 0
  %v7603 = vsel %vm7091, 1, 0
  %v7604 = vsel %vm7092, 1, 0
  %v7605 = vsel %vm7093, 1, 0
  %v7606 = vsel %vm7094, 1, 0
  %v7607 = vsel %vm7095, 1, 0
  %v7608 = vsel %vm7096, 1, 0
  %v7609 = vsel %vm7097, 1, 0
  %v7610 = vsel %vm7098, 1, 0
  %v7611 = vsel %vm7099, 1, 0
  %v7612 = vsel %vm7100, 1, 0
  %v7613 = vsel %vm7101, 1, 0
  %v7614 = vsel %vm7102, 1, 0
  %v7615 = vsel %vm7103, 1, 0
  %v7616 = vsel %vm7104, 1, 0
  %v7617 = vsel %vm7105, 1, 0
  %v7618 = vsel %vm7106, 1, 0
  %v7619 = vsel %vm7107, 1, 0
  %v7620 = vsel %vm7108, 1, 0
  %v7621 = vsel %vm7109, 1, 0
  %v7622 = vsel %vm7110, 1, 0
  %v7623 = vsel %vm7111, 1, 0
  %v7624 = vsel %vm7112, 1, 0
  %v7625 = vsel %vm7113, 1, 0
  %v7626 = vsel %vm7114, 1, 0
  %v7627 = vsel %vm7115, 1, 0
  %v7628 = vsel %vm7116, 1, 0
  %v7629 = vsel %vm7117, 1, 0
  %v7630 = vsel %vm7118, 1, 0
  %v7631 = vsel %vm7119, 1, 0
  %v7632 = vsel %vm7120, 1, 0
  %v7633 = vsel %vm7121, 1, 0
  %v7634 = vsel %vm7122, 1, 0
  %v7635 = vsel %vm7123, 1, 0
  %v7636 = vsel %vm7124, 1, 0
  %v7637 = vsel %vm7125, 1, 0
  %v7638 = vsel %vm7126, 1, 0
  %v7639 = vsel %vm7127, 1, 0
  %v7640 = vsel %vm7128, 1, 0
  %v7641 = vsel %vm7129, 1, 0
  %v7642 = vsel %vm7130, 1, 0
  %v7643 = vsel %vm7131, 1, 0
  %v7644 = vsel %vm7132, 1, 0
  %v7645 = vsel %vm7133, 1, 0
  %v7646 = vsel %vm7134, 1, 0
  %v7647 = vsel %vm7135, 1, 0
  %v7648 = vsel %vm7136, 1, 0
  %v7649 = vsel %vm7137, 1, 0
  %v7650 = vsel %vm7138, 1, 0
  %v7651 = vsel %vm7139, 1, 0
  %v7652 = vsel %vm7140, 1, 0
  %v7653 = vsel %vm7141, 1, 0
  %v7654 = vsel %vm7142, 1, 0
  %v7655 = vsel %vm7143, 1, 0
  %v7656 = vsel %vm7144, 1, 0
  %v7657 = vsel %vm7145, 1, 0
  %v7658 = vsel %vm7146, 1, 0
  %v7659 = vsel %vm7147, 1, 0
  %v7660 = vsel %vm7148, 1, 0
  %v7661 = vsel %vm7149, 1, 0
  %v7662 = vsel %vm7150, 1, 0
  %v7663 = vsel %vm7151, 1, 0
  %v7664 = vsel %vm7152, 1, 0
  %v7665 = vsel %vm7153, 1, 0
  %v7666 = vsel %vm7154, 1, 0
  %v7667 = vsel %vm7155, 1, 0
  %v7668 = vsel %vm7156, 1, 0
  %v7669 = vsel %vm7157, 1, 0
  %v7670 = vsel %vm7158, 1, 0
  %v7671 = vsel %vm7159, 1, 0
  %v7672 = vsel %vm7160, 1, 0
  %v7673 = vsel %vm7161, 1, 0
  %v7674 = vsel %vm7162, 1, 0
  %v7675 = vsel %vm7163, 1, 0
  %v7676 = vsel %vm7164, 1, 0
  %v7677 = vsel %vm7165, 1, 0
  %v7678 = vsel %vm7166, 1, 0
  %v7679 = vsel %vm7167, 1, 0
  %v7680 = vsel %vm7168, 1, 0
  %v7681 = vsel %vm7169, 1, 0
  %v7682 = vsel %vm7170, 1, 0
  %v7683 = vsel %vm7171, 1, 0
  %v7684 = vsel %vm7172, 1, 0
  %v7685 = vsel %vm7173, 1, 0
  %v7686 = vsel %vm7174, 1, 0
  %v7687 = vsel %vm7175, 1, 0
  %v7688 = vsel %vm7176, 1, 0
  %v7689 = vsel %vm7177, 1, 0
  %v7690 = vsel %vm7178, 1, 0
  %v7691 = vsel %vm7179, 1, 0
  %v7692 = vsel %vm7180, 1, 0
  %v7693 = vsel %vm7181, 1, 0
  %v7694 = vsel %vm7182, 1, 0
  %v7695 = vsel %vm7183, 1, 0
  %v7696 = vsel %vm7184, 1, 0
  %v7697 = vsel %vm7185, 1, 0
  %v7698 = vsel %vm7186, 1, 0
  %v7699 = vsel %vm7187, 1, 0
  %v7700 = vsel %vm7188, 1, 0
  %v7701 = vsel %vm7189, 1, 0
  %v7702 = vsel %vm7190, 1, 0
  %v7703 = vsel %vm7191, 1, 0
  %v7704 = vsel %vm7192, 1, 0
  %v7705 = vsel %vm7193, 1, 0
  %v7706 = vsel %vm7194, 1, 0
  %v7707 = vsel %vm7195, 1, 0
  %v7708 = vsel %vm7196, 1, 0
  %v7709 = vsel %vm7197, 1, 0
  %v7710 = vsel %vm7198, 1, 0
  %v7711 = vsel %vm7199, 1, 0
  %v7712 = vsel %vm7200, 1, 0
  %v7713 = vsel %vm7201, 1, 0
  %v7714 = vsel %vm7202, 1, 0
  %v7715 = vsel %vm7203, 1, 0
  %v7716 = vsel %vm7204, 1, 0
  %v7717 = vsel %vm7205, 1, 0
  %v7718 = vsel %vm7206, 1, 0
  %v7719 = vsel %vm7207, 1, 0
  %v7720 = vsel %vm7208, 1, 0
  %v7721 = vsel %vm7209, 1, 0
  %v7722 = vsel %vm7210, 1, 0
  %v7723 = vsel %vm7211, 1, 0
  %v7724 = vsel %vm7212, 1, 0
  %v7725 = vsel %vm7213, 1, 0
  %v7726 = vsel %vm7214, 1, 0
  %v7727 = vsel %vm7215, 1, 0
  %v7728 = vsel %vm7216, 1, 0
  %v7729 = vsel %vm7217, 1, 0
  %v7730 = vsel %vm7218, 1, 0
  %v7731 = vsel %vm7219, 1, 0
  %v7732 = vsel %vm7220, 1, 0
  %v7733 = vsel %vm7221, 1, 0
  %v7734 = vsel %vm7222, 1, 0
  %v7735 = vsel %vm7223, 1, 0
  %v7736 = vsel %vm7224, 1, 0
  %v7737 = vsel %vm7225, 1, 0
  %v7738 = vsel %vm7226, 1, 0
  %v7739 = vsel %vm7227, 1, 0
  %v7740 = vsel %vm7228, 1, 0
  %v7741 = vsel %vm7229, 1, 0
  %v7742 = vsel %vm7230, 1, 0
  %v7743 = vsel %vm7231, 1, 0
  %v7744 = vsel %vm7232, 1, 0
  %v7745 = vsel %vm7233, 1, 0
  %v7746 = vsel %vm7234, 1, 0
  %v7747 = vsel %vm7235, 1, 0
  %v7748 = vsel %vm7236, 1, 0
  %v7749 = vsel %vm7237, 1, 0
  %v7750 = vsel %vm7238, 1, 0
  %v7751 = vsel %vm7239, 1, 0
  %v7752 = vsel %vm7240, 1, 0
  %v7753 = vsel %vm7241, 1, 0
  %v7754 = vsel %vm7242, 1, 0
  %v7755 = vsel %vm7243, 1, 0
  %v7756 = vsel %vm7244, 1, 0
  %v7757 = vsel %vm7245, 1, 0
  %v7758 = vsel %vm7246, 1, 0
  %v7759 = vsel %vm7247, 1, 0
  %v7760 = vsel %vm7248, 1, 0
  %v7761 = vsel %vm7249, 1, 0
  %v7762 = vsel %vm7250, 1, 0
  %v7763 = vsel %vm7251, 1, 0
  %v7764 = vsel %vm7252, 1, 0
  %v7765 = vsel %vm7253, 1, 0
  %v7766 = vsel %vm7254, 1, 0
  %v7767 = vsel %vm7255, 1, 0
  %v7768 = vsel %vm7256, 1, 0
  %v7769 = vsel %vm7257, 1, 0
  %v7770 = vsel %vm7258, 1, 0
  %v7771 = vsel %vm7259, 1, 0
  %v7772 = vsel %vm7260, 1, 0
  %v7773 = vsel %vm7261, 1, 0
  %v7774 = vsel %vm7262, 1, 0
  %v7775 = vsel %vm7263, 1, 0
  %v7776 = vsel %vm7264, 1, 0
  %v7777 = vsel %vm7265, 1, 0
  %v7778 = vsel %vm7266, 1, 0
  %v7779 = vsel %vm7267, 1, 0
  %v7780 = vsel %vm7268, 1, 0
  %v7781 = vsel %vm7269, 1, 0
  %v7782 = vsel %vm7270, 1, 0
  %v7783 = vsel %vm7271, 1, 0
  %v7784 = vsel %vm7272, 1, 0
  %v7785 = vsel %vm7273, 1, 0
  %v7786 = vsel %vm7274, 1, 0
  %v7787 = vsel %vm7275, 1, 0
  %v7788 = vsel %vm7276, 1, 0
  %v7789 = vsel %vm7277, 1, 0
  %v7790 = vsel %vm7278, 1, 0
  %v7791 = vsel %vm7279, 1, 0
  %v7792 = vsel %vm7280, 1, 0
  %v7793 = vsel %vm7281, 1, 0
  %v7794 = vsel %vm7282, 1, 0
  %v7795 = vsel %vm7283, 1, 0
  %v7796 = vsel %vm7284, 1, 0
  %v7797 = vsel %vm7285, 1, 0
  %v7798 = vsel %vm7286, 1, 0
  %v7799 = vsel %vm7287, 1, 0
  %v7800 = vsel %vm7288, 1, 0
  %v7801 = vsel %vm7289, 1, 0
  %v7802 = vsel %vm7290, 1, 0
  %v7803 = vsel %vm7291, 1, 0
  %v7804 = vsel %vm7292, 1, 0
  %v7805 = vsel %vm7293, 1, 0
  %v7806 = vsel %vm7294, 1, 0
  %v7807 = vsel %vm7295, 1, 0
  %v7808 = vsel %vm7296, 1, 0
  %v7809 = vsel %vm7297, 1, 0
  %v7810 = vsel %vm7298, 1, 0
  %v7811 = vsel %vm7299, 1, 0
  %v7812 = vsel %vm7300, 1, 0
  %v7813 = vsel %vm7301, 1, 0
  %v7814 = vsel %vm7302, 1, 0
  %v7815 = vsel %vm7303, 1, 0
  %v7816 = vsel %vm7304, 1, 0
  %v7817 = vsel %vm7305, 1, 0
  %v7818 = vsel %vm7306, 1, 0
  %v7819 = vsel %vm7307, 1, 0
  %v7820 = vsel %vm7308, 1, 0
  %v7821 = vsel %vm7309, 1, 0
  %v7822 = vsel %vm7310, 1, 0
  %v7823 = vsel %vm7311, 1, 0
  %v7824 = vsel %vm7312, 1, 0
  %v7825 = vsel %vm7313, 1, 0
  %v7826 = vsel %vm7314, 1, 0
  %v7827 = vsel %vm7315, 1, 0
  %v7828 = vsel %vm7316, 1, 0
  %v7829 = vsel %vm7317, 1, 0
  %v7830 = vsel %vm7318, 1, 0
  %v7831 = vsel %vm7319, 1, 0
  %v7832 = vsel %vm7320, 1, 0
  %v7833 = vsel %vm7321, 1, 0
  %v7834 = vsel %vm7322, 1, 0
  %v7835 = vsel %vm7323, 1, 0
  %v7836 = vsel %vm7324, 1, 0
  %v7837 = vsel %vm7325, 1, 0
  %v7838 = vsel %vm7326, 1, 0
  %v7839 = vsel %vm7327, 1, 0
  %v7840 = vsel %vm7328, 1, 0
  %v7841 = vsel %vm7329, 1, 0
  %v7842 = vsel %vm7330, 1, 0
  %v7843 = vsel %vm7331, 1, 0
  %v7844 = vsel %vm7332, 1, 0
  %v7845 = vsel %vm7333, 1, 0
  %v7846 = vsel %vm7334, 1, 0
  %v7847 = vsel %vm7335, 1, 0
  %v7848 = vsel %vm7336, 1, 0
  %v7849 = vsel %vm7337, 1, 0
  %v7850 = vsel %vm7338, 1, 0
  %v7851 = vsel %vm7339, 1, 0
  %v7852 = vsel %vm7340, 1, 0
  %v7853 = vsel %vm7341, 1, 0
  %v7854 = vsel %vm7342, 1, 0
  %v7855 = vsel %vm7343, 1, 0
  %v7856 = vsel %vm7344, 1, 0
  %v7857 = vsel %vm7345, 1, 0
  %v7858 = vsel %vm7346, 1, 0
  %v7859 = vsel %vm7347, 1, 0
  %v7860 = vsel %vm7348, 1, 0
  %v7861 = vsel %vm7349, 1, 0
  %v7862 = vsel %vm7350, 1, 0
  %v7863 = vsel %vm7351, 1, 0
  %v7864 = vsel %vm7352, 1, 0
  %v7865 = vsel %vm7353, 1, 0
  %v7866 = vsel %vm7354, 1, 0
  %v7867 = vsel %vm7355, 1, 0
  %v7868 = vsel %vm7356, 1, 0
  %v7869 = vsel %vm7357, 1, 0
  %v7870 = vsel %vm7358, 1, 0
  %v7871 = vsel %vm7359, 1, 0
  %v7872 = vsel %vm7360, 1, 0
  %v7873 = vsel %vm7361, 1, 0
  %v7874 = vsel %vm7362, 1, 0
  %v7875 = vsel %vm7363, 1, 0
  %v7876 = vsel %vm7364, 1, 0
  %v7877 = vsel %vm7365, 1, 0
  %v7878 = vsel %vm7366, 1, 0
  %v7879 = vsel %vm7367, 1, 0
  %v7880 = vsel %vm7368, 1, 0
  %v7881 = vsel %vm7369, 1, 0
  %v7882 = vsel %vm7370, 1, 0
  %v7883 = vsel %vm7371, 1, 0
  %v7884 = vsel %vm7372, 1, 0
  %v7885 = vsel %vm7373, 1, 0
  %v7886 = vsel %vm7374, 1, 0
  %v7887 = vsel %vm7375, 1, 0
  %v7888 = vsel %vm7376, 1, 0
  %v7889 = vsel %vm7377, 1, 0
  %v7890 = vsel %vm7378, 1, 0
  %v7891 = vsel %vm7379, 1, 0
  %v7892 = vsel %vm7380, 1, 0
  %v7893 = vsel %vm7381, 1, 0
  %v7894 = vsel %vm7382, 1, 0
  %v7895 = vsel %vm7383, 1, 0
  %v7896 = vsel %vm7384, 1, 0
  %v7897 = vsel %vm7385, 1, 0
  %v7898 = vsel %vm7386, 1, 0
  %v7899 = vsel %vm7387, 1, 0
  %v7900 = vsel %vm7388, 1, 0
  %v7901 = vsel %vm7389, 1, 0
  %v7902 = vsel %vm7390, 1, 0
  %v7903 = vsel %vm7391, 1, 0
  %v7904 = vsel %vm7392, 1, 0
  %v7905 = vsel %vm7393, 1, 0
  %v7906 = vsel %vm7394, 1, 0
  %v7907 = vsel %vm7395, 1, 0
  %v7908 = vsel %vm7396, 1, 0
  %v7909 = vsel %vm7397, 1, 0
  %v7910 = vcvt.s32.f32 %v7398
  %v7911 = vcvt.s32.f32 %v7399
  %v7912 = vcvt.s32.f32 %v7400
  %v7913 = vcvt.s32.f32 %v7401
  %v7914 = vcvt.s32.f32 %v7402
  %v7915 = vcvt.s32.f32 %v7403
  %v7916 = vcvt.s32.f32 %v7404
  %v7917 = vcvt.s32.f32 %v7405
  %v7918 = vcvt.s32.f32 %v7406
  %v7919 = vcvt.s32.f32 %v7407
  %v7920 = vcvt.s32.f32 %v7408
  %v7921 = vcvt.s32.f32 %v7409
  %v7922 = vcvt.s32.f32 %v7410
  %v7923 = vcvt.s32.f32 %v7411
  %v7924 = vcvt.s32.f32 %v7412
  %v7925 = vcvt.s32.f32 %v7413
  %v7926 = vcvt.s32.f32 %v7414
  %v7927 = vcvt.s32.f32 %v7415
  %v7928 = vcvt.s32.f32 %v7416
  %v7929 = vcvt.s32.f32 %v7417
  %v7930 = vcvt.s32.f32 %v7418
  %v7931 = vcvt.s32.f32 %v7419
  %v7932 = vcvt.s32.f32 %v7420
  %v7933 = vcvt.s32.f32 %v7421
  %v7934 = vcvt.s32.f32 %v7422
  %v7935 = vcvt.s32.f32 %v7423
  %v7936 = vcvt.s32.f32 %v7424
  %v7937 = vcvt.s32.f32 %v7425
  %v7938 = vcvt.s32.f32 %v7426
  %v7939 = vcvt.s32.f32 %v7427
  %v7940 = vcvt.s32.f32 %v7428
  %v7941 = vcvt.s32.f32 %v7429
  %v7942 = vcvt.s32.f32 %v7430
  %v7943 = vcvt.s32.f32 %v7431
  %v7944 = vcvt.s32.f32 %v7432
  %v7945 = vcvt.s32.f32 %v7433
  %v7946 = vcvt.s32.f32 %v7434
  %v7947 = vcvt.s32.f32 %v7435
  %v7948 = vcvt.s32.f32 %v7436
  %v7949 = vcvt.s32.f32 %v7437
  %v7950 = vcvt.s32.f32 %v7438
  %v7951 = vcvt.s32.f32 %v7439
  %v7952 = vcvt.s32.f32 %v7440
  %v7953 = vcvt.s32.f32 %v7441
  %v7954 = vcvt.s32.f32 %v7442
  %v7955 = vcvt.s32.f32 %v7443
  %v7956 = vcvt.s32.f32 %v7444
  %v7957 = vcvt.s32.f32 %v7445
  %v7958 = vcvt.s32.f32 %v7446
  %v7959 = vcvt.s32.f32 %v7447
  %v7960 = vcvt.s32.f32 %v7448
  %v7961 = vcvt.s32.f32 %v7449
  %v7962 = vcvt.s32.f32 %v7450
  %v7963 = vcvt.s32.f32 %v7451
  %v7964 = vcvt.s32.f32 %v7452
  %v7965 = vcvt.s32.f32 %v7453
  %v7966 = vcvt.s32.f32 %v7454
  %v7967 = vcvt.s32.f32 %v7455
  %v7968 = vcvt.s32.f32 %v7456
  %v7969 = vcvt.s32.f32 %v7457
  %v7970 = vcvt.s32.f32 %v7458
  %v7971 = vcvt.s32.f32 %v7459
  %v7972 = vcvt.s32.f32 %v7460
  %v7973 = vcvt.s32.f32 %v7461
  %v7974 = vcvt.s32.f32 %v7462
  %v7975 = vcvt.s32.f32 %v7463
  %v7976 = vcvt.s32.f32 %v7464
  %v7977 = vcvt.s32.f32 %v7465
  %v7978 = vcvt.s32.f32 %v7466
  %v7979 = vcvt.s32.f32 %v7467
  %v7980 = vcvt.s32.f32 %v7468
  %v7981 = vcvt.s32.f32 %v7469
  %v7982 = vcvt.s32.f32 %v7470
  %v7983 = vcvt.s32.f32 %v7471
  %v7984 = vcvt.s32.f32 %v7472
  %v7985 = vcvt.s32.f32 %v7473
  %v7986 = vcvt.s32.f32 %v7474
  %v7987 = vcvt.s32.f32 %v7475
  %v7988 = vcvt.s32.f32 %v7476
  %v7989 = vcvt.s32.f32 %v7477
  %v7990 = vcvt.s32.f32 %v7478
  %v7991 = vcvt.s32.f32 %v7479
  %v7992 = vcvt.s32.f32 %v7480
  %v7993 = vcvt.s32.f32 %v7481
  %v7994 = vcvt.s32.f32 %v7482
  %v7995 = vcvt.s32.f32 %v7483
  %v7996 = vcvt.s32.f32 %v7484
  %v7997 = vcvt.s32.f32 %v7485
  %v7998 = vcvt.s32.f32 %v7486
  %v7999 = vcvt.s32.f32 %v7487
  %v8000 = vcvt.s32.f32 %v7488
  %v8001 = vcvt.s32.f32 %v7489
  %v8002 = vcvt.s32.f32 %v7490
  %v8003 = vcvt.s32.f32 %v7491
  %v8004 = vcvt.s32.f32 %v7492
  %v8005 = vcvt.s32.f32 %v7493
  %v8006 = vcvt.s32.f32 %v7494
  %v8007 = vcvt.s32.f32 %v7495
  %v8008 = vcvt.s32.f32 %v7496
  %v8009 = vcvt.s32.f32 %v7497
  %v8010 = vcvt.s32.f32 %v7498
  %v8011 = vcvt.s32.f32 %v7499
  %v8012 = vcvt.s32.f32 %v7500
  %v8013 = vcvt.s32.f32 %v7501
  %v8014 = vcvt.s32.f32 %v7502
  %v8015 = vcvt.s32.f32 %v7503
  %v8016 = vcvt.s32.f32 %v7504
  %v8017 = vcvt.s32.f32 %v7505
  %v8018 = vcvt.s32.f32 %v7506
  %v8019 = vcvt.s32.f32 %v7507
  %v8020 = vcvt.s32.f32 %v7508
  %v8021 = vcvt.s32.f32 %v7509
  %v8022 = vcvt.s32.f32 %v7510
  %v8023 = vcvt.s32.f32 %v7511
  %v8024 = vcvt.s32.f32 %v7512
  %v8025 = vcvt.s32.f32 %v7513
  %v8026 = vcvt.s32.f32 %v7514
  %v8027 = vcvt.s32.f32 %v7515
  %v8028 = vcvt.s32.f32 %v7516
  %v8029 = vcvt.s32.f32 %v7517
  %v8030 = vcvt.s32.f32 %v7518
  %v8031 = vcvt.s32.f32 %v7519
  %v8032 = vcvt.s32.f32 %v7520
  %v8033 = vcvt.s32.f32 %v7521
  %v8034 = vcvt.s32.f32 %v7522
  %v8035 = vcvt.s32.f32 %v7523
  %v8036 = vcvt.s32.f32 %v7524
  %v8037 = vcvt.s32.f32 %v7525
  %v8038 = vcvt.s32.f32 %v7526
  %v8039 = vcvt.s32.f32 %v7527
  %v8040 = vcvt.s32.f32 %v7528
  %v8041 = vcvt.s32.f32 %v7529
  %v8042 = vcvt.s32.f32 %v7530
  %v8043 = vcvt.s32.f32 %v7531
  %v8044 = vcvt.s32.f32 %v7532
  %v8045 = vcvt.s32.f32 %v7533
  %v8046 = vcvt.s32.f32 %v7534
  %v8047 = vcvt.s32.f32 %v7535
  %v8048 = vcvt.s32.f32 %v7536
  %v8049 = vcvt.s32.f32 %v7537
  %v8050 = vcvt.s32.f32 %v7538
  %v8051 = vcvt.s32.f32 %v7539
  %v8052 = vcvt.s32.f32 %v7540
  %v8053 = vcvt.s32.f32 %v7541
  %v8054 = vcvt.s32.f32 %v7542
  %v8055 = vcvt.s32.f32 %v7543
  %v8056 = vcvt.s32.f32 %v7544
  %v8057 = vcvt.s32.f32 %v7545
  %v8058 = vcvt.s32.f32 %v7546
  %v8059 = vcvt.s32.f32 %v7547
  %v8060 = vcvt.s32.f32 %v7548
  %v8061 = vcvt.s32.f32 %v7549
  %v8062 = vcvt.s32.f32 %v7550
  %v8063 = vcvt.s32.f32 %v7551
  %v8064 = vcvt.s32.f32 %v7552
  %v8065 = vcvt.s32.f32 %v7553
  %v8066 = vcvt.s32.f32 %v7554
  %v8067 = vcvt.s32.f32 %v7555
  %v8068 = vcvt.s32.f32 %v7556
  %v8069 = vcvt.s32.f32 %v7557
  %v8070 = vcvt.s32.f32 %v7558
  %v8071 = vcvt.s32.f32 %v7559
  %v8072 = vcvt.s32.f32 %v7560
  %v8073 = vcvt.s32.f32 %v7561
  %v8074 = vcvt.s32.f32 %v7562
  %v8075 = vcvt.s32.f32 %v7563
  %v8076 = vcvt.s32.f32 %v7564
  %v8077 = vcvt.s32.f32 %v7565
  %v8078 = vcvt.s32.f32 %v7566
  %v8079 = vcvt.s32.f32 %v7567
  %v8080 = vcvt.s32.f32 %v7568
  %v8081 = vcvt.s32.f32 %v7569
  %v8082 = vcvt.s32.f32 %v7570
  %v8083 = vcvt.s32.f32 %v7571
  %v8084 = vcvt.s32.f32 %v7572
  %v8085 = vcvt.s32.f32 %v7573
  %v8086 = vcvt.s32.f32 %v7574
  %v8087 = vcvt.s32.f32 %v7575
  %v8088 = vcvt.s32.f32 %v7576
  %v8089 = vcvt.s32.f32 %v7577
  %v8090 = vcvt.s32.f32 %v7578
  %v8091 = vcvt.s32.f32 %v7579
  %v8092 = vcvt.s32.f32 %v7580
  %v8093 = vcvt.s32.f32 %v7581
  %v8094 = vcvt.s32.f32 %v7582
  %v8095 = vcvt.s32.f32 %v7583
  %v8096 = vcvt.s32.f32 %v7584
  %v8097 = vcvt.s32.f32 %v7585
  %v8098 = vcvt.s32.f32 %v7586
  %v8099 = vcvt.s32.f32 %v7587
  %v8100 = vcvt.s32.f32 %v7588
  %v8101 = vcvt.s32.f32 %v7589
  %v8102 = vcvt.s32.f32 %v7590
  %v8103 = vcvt.s32.f32 %v7591
  %v8104 = vcvt.s32.f32 %v7592
  %v8105 = vcvt.s32.f32 %v7593
  %v8106 = vcvt.s32.f32 %v7594
  %v8107 = vcvt.s32.f32 %v7595
  %v8108 = vcvt.s32.f32 %v7596
  %v8109 = vcvt.s32.f32 %v7597
  %v8110 = vcvt.s32.f32 %v7598
  %v8111 = vcvt.s32.f32 %v7599
  %v8112 = vcvt.s32.f32 %v7600
  %v8113 = vcvt.s32.f32 %v7601
  %v8114 = vcvt.s32.f32 %v7602
  %v8115 = vcvt.s32.f32 %v7603
  %v8116 = vcvt.s32.f32 %v7604
  %v8117 = vcvt.s32.f32 %v7605
  %v8118 = vcvt.s32.f32 %v7606
  %v8119 = vcvt.s32.f32 %v7607
  %v8120 = vcvt.s32.f32 %v7608
  %v8121 = vcvt.s32.f32 %v7609
  %v8122 = vcvt.s32.f32 %v7610
  %v8123 = vcvt.s32.f32 %v7611
  %v8124 = vcvt.s32.f32 %v7612
  %v8125 = vcvt.s32.f32 %v7613
  %v8126 = vcvt.s32.f32 %v7614
  %v8127 = vcvt.s32.f32 %v7615
  %v8128 = vcvt.s32.f32 %v7616
  %v8129 = vcvt.s32.f32 %v7617
  %v8130 = vcvt.s32.f32 %v7618
  %v8131 = vcvt.s32.f32 %v7619
  %v8132 = vcvt.s32.f32 %v7620
  %v8133 = vcvt.s32.f32 %v7621
  %v8134 = vcvt.s32.f32 %v7622
  %v8135 = vcvt.s32.f32 %v7623
  %v8136 = vcvt.s32.f32 %v7624
  %v8137 = vcvt.s32.f32 %v7625
  %v8138 = vcvt.s32.f32 %v7626
  %v8139 = vcvt.s32.f32 %v7627
  %v8140 = vcvt.s32.f32 %v7628
  %v8141 = vcvt.s32.f32 %v7629
  %v8142 = vcvt.s32.f32 %v7630
  %v8143 = vcvt.s32.f32 %v7631
  %v8144 = vcvt.s32.f32 %v7632
  %v8145 = vcvt.s32.f32 %v7633
  %v8146 = vcvt.s32.f32 %v7634
  %v8147 = vcvt.s32.f32 %v7635
  %v8148 = vcvt.s32.f32 %v7636
  %v8149 = vcvt.s32.f32 %v7637
  %v8150 = vcvt.s32.f32 %v7638
  %v8151 = vcvt.s32.f32 %v7639
  %v8152 = vcvt.s32.f32 %v7640
  %v8153 = vcvt.s32.f32 %v7641
  %v8154 = vcvt.s32.f32 %v7642
  %v8155 = vcvt.s32.f32 %v7643
  %v8156 = vcvt.s32.f32 %v7644
  %v8157 = vcvt.s32.f32 %v7645
  %v8158 = vcvt.s32.f32 %v7646
  %v8159 = vcvt.s32.f32 %v7647
  %v8160 = vcvt.s32.f32 %v7648
  %v8161 = vcvt.s32.f32 %v7649
  %v8162 = vcvt.s32.f32 %v7650
  %v8163 = vcvt.s32.f32 %v7651
  %v8164 = vcvt.s32.f32 %v7652
  %v8165 = vcvt.s32.f32 %v7653
  %v8166 = vcvt.s32.f32 %v7654
  %v8167 = vcvt.s32.f32 %v7655
  %v8168 = vcvt.s32.f32 %v7656
  %v8169 = vcvt.s32.f32 %v7657
  %v8170 = vcvt.s32.f32 %v7658
  %v8171 = vcvt.s32.f32 %v7659
  %v8172 = vcvt.s32.f32 %v7660
  %v8173 = vcvt.s32.f32 %v7661
  %v8174 = vcvt.s32.f32 %v7662
  %v8175 = vcvt.s32.f32 %v7663
  %v8176 = vcvt.s32.f32 %v7664
  %v8177 = vcvt.s32.f32 %v7665
  %v8178 = vcvt.s32.f32 %v7666
  %v8179 = vcvt.s32.f32 %v7667
  %v8180 = vcvt.s32.f32 %v7668
  %v8181 = vcvt.s32.f32 %v7669
  %v8182 = vcvt.s32.f32 %v7670
  %v8183 = vcvt.s32.f32 %v7671
  %v8184 = vcvt.s32.f32 %v7672
  %v8185 = vcvt.s32.f32 %v7673
  %v8186 = vcvt.s32.f32 %v7674
  %v8187 = vcvt.s32.f32 %v7675
  %v8188 = vcvt.s32.f32 %v7676
  %v8189 = vcvt.s32.f32 %v7677
  %v8190 = vcvt.s32.f32 %v7678
  %v8191 = vcvt.s32.f32 %v7679
  %v8192 = vcvt.s32.f32 %v7680
  %v8193 = vcvt.s32.f32 %v7681
  %v8194 = vcvt.s32.f32 %v7682
  %v8195 = vcvt.s32.f32 %v7683
  %v8196 = vcvt.s32.f32 %v7684
  %v8197 = vcvt.s32.f32 %v7685
  %v8198 = vcvt.s32.f32 %v7686
  %v8199 = vcvt.s32.f32 %v7687
  %v8200 = vcvt.s32.f32 %v7688
  %v8201 = vcvt.s32.f32 %v7689
  %v8202 = vcvt.s32.f32 %v7690
  %v8203 = vcvt.s32.f32 %v7691
  %v8204 = vcvt.s32.f32 %v7692
  %v8205 = vcvt.s32.f32 %v7693
  %v8206 = vcvt.s32.f32 %v7694
  %v8207 = vcvt.s32.f32 %v7695
  %v8208 = vcvt.s32.f32 %v7696
  %v8209 = vcvt.s32.f32 %v7697
  %v8210 = vcvt.s32.f32 %v7698
  %v8211 = vcvt.s32.f32 %v7699
  %v8212 = vcvt.s32.f32 %v7700
  %v8213 = vcvt.s32.f32 %v7701
  %v8214 = vcvt.s32.f32 %v7702
  %v8215 = vcvt.s32.f32 %v7703
  %v8216 = vcvt.s32.f32 %v7704
  %v8217 = vcvt.s32.f32 %v7705
  %v8218 = vcvt.s32.f32 %v7706
  %v8219 = vcvt.s32.f32 %v7707
  %v8220 = vcvt.s32.f32 %v7708
  %v8221 = vcvt.s32.f32 %v7709
  %v8222 = vcvt.s32.f32 %v7710
  %v8223 = vcvt.s32.f32 %v7711
  %v8224 = vcvt.s32.f32 %v7712
  %v8225 = vcvt.s32.f32 %v7713
  %v8226 = vcvt.s32.f32 %v7714
  %v8227 = vcvt.s32.f32 %v7715
  %v8228 = vcvt.s32.f32 %v7716
  %v8229 = vcvt.s32.f32 %v7717
  %v8230 = vcvt.s32.f32 %v7718
  %v8231 = vcvt.s32.f32 %v7719
  %v8232 = vcvt.s32.f32 %v7720
  %v8233 = vcvt.s32.f32 %v7721
  %v8234 = vcvt.s32.f32 %v7722
  %v8235 = vcvt.s32.f32 %v7723
  %v8236 = vcvt.s32.f32 %v7724
  %v8237 = vcvt.s32.f32 %v7725
  %v8238 = vcvt.s32.f32 %v7726
  %v8239 = vcvt.s32.f32 %v7727
  %v8240 = vcvt.s32.f32 %v7728
  %v8241 = vcvt.s32.f32 %v7729
  %v8242 = vcvt.s32.f32 %v7730
  %v8243 = vcvt.s32.f32 %v7731
  %v8244 = vcvt.s32.f32 %v7732
  %v8245 = vcvt.s32.f32 %v7733
  %v8246 = vcvt.s32.f32 %v7734
  %v8247 = vcvt.s32.f32 %v7735
  %v8248 = vcvt.s32.f32 %v7736
  %v8249 = vcvt.s32.f32 %v7737
  %v8250 = vcvt.s32.f32 %v7738
  %v8251 = vcvt.s32.f32 %v7739
  %v8252 = vcvt.s32.f32 %v7740
  %v8253 = vcvt.s32.f32 %v7741
  %v8254 = vcvt.s32.f32 %v7742
  %v8255 = vcvt.s32.f32 %v7743
  %v8256 = vcvt.s32.f32 %v7744
  %v8257 = vcvt.s32.f32 %v7745
  %v8258 = vcvt.s32.f32 %v7746
  %v8259 = vcvt.s32.f32 %v7747
  %v8260 = vcvt.s32.f32 %v7748
  %v8261 = vcvt.s32.f32 %v7749
  %v8262 = vcvt.s32.f32 %v7750
  %v8263 = vcvt.s32.f32 %v7751
  %v8264 = vcvt.s32.f32 %v7752
  %v8265 = vcvt.s32.f32 %v7753
  %v8266 = vcvt.s32.f32 %v7754
  %v8267 = vcvt.s32.f32 %v7755
  %v8268 = vcvt.s32.f32 %v7756
  %v8269 = vcvt.s32.f32 %v7757
  %v8270 = vcvt.s32.f32 %v7758
  %v8271 = vcvt.s32.f32 %v7759
  %v8272 = vcvt.s32.f32 %v7760
  %v8273 = vcvt.s32.f32 %v7761
  %v8274 = vcvt.s32.f32 %v7762
  %v8275 = vcvt.s32.f32 %v7763
  %v8276 = vcvt.s32.f32 %v7764
  %v8277 = vcvt.s32.f32 %v7765
  %v8278 = vcvt.s32.f32 %v7766
  %v8279 = vcvt.s32.f32 %v7767
  %v8280 = vcvt.s32.f32 %v7768
  %v8281 = vcvt.s32.f32 %v7769
  %v8282 = vcvt.s32.f32 %v7770
  %v8283 = vcvt.s32.f32 %v7771
  %v8284 = vcvt.s32.f32 %v7772
  %v8285 = vcvt.s32.f32 %v7773
  %v8286 = vcvt.s32.f32 %v7774
  %v8287 = vcvt.s32.f32 %v7775
  %v8288 = vcvt.s32.f32 %v7776
  %v8289 = vcvt.s32.f32 %v7777
  %v8290 = vcvt.s32.f32 %v7778
  %v8291 = vcvt.s32.f32 %v7779
  %v8292 = vcvt.s32.f32 %v7780
  %v8293 = vcvt.s32.f32 %v7781
  %v8294 = vcvt.s32.f32 %v7782
  %v8295 = vcvt.s32.f32 %v7783
  %v8296 = vcvt.s32.f32 %v7784
  %v8297 = vcvt.s32.f32 %v7785
  %v8298 = vcvt.s32.f32 %v7786
  %v8299 = vcvt.s32.f32 %v7787
  %v8300 = vcvt.s32.f32 %v7788
  %v8301 = vcvt.s32.f32 %v7789
  %v8302 = vcvt.s32.f32 %v7790
  %v8303 = vcvt.s32.f32 %v7791
  %v8304 = vcvt.s32.f32 %v7792
  %v8305 = vcvt.s32.f32 %v7793
  %v8306 = vcvt.s32.f32 %v7794
  %v8307 = vcvt.s32.f32 %v7795
  %v8308 = vcvt.s32.f32 %v7796
  %v8309 = vcvt.s32.f32 %v7797
  %v8310 = vcvt.s32.f32 %v7798
  %v8311 = vcvt.s32.f32 %v7799
  %v8312 = vcvt.s32.f32 %v7800
  %v8313 = vcvt.s32.f32 %v7801
  %v8314 = vcvt.s32.f32 %v7802
  %v8315 = vcvt.s32.f32 %v7803
  %v8316 = vcvt.s32.f32 %v7804
  %v8317 = vcvt.s32.f32 %v7805
  %v8318 = vcvt.s32.f32 %v7806
  %v8319 = vcvt.s32.f32 %v7807
  %v8320 = vcvt.s32.f32 %v7808
  %v8321 = vcvt.s32.f32 %v7809
  %v8322 = vcvt.s32.f32 %v7810
  %v8323 = vcvt.s32.f32 %v7811
  %v8324 = vcvt.s32.f32 %v7812
  %v8325 = vcvt.s32.f32 %v7813
  %v8326 = vcvt.s32.f32 %v7814
  %v8327 = vcvt.s32.f32 %v7815
  %v8328 = vcvt.s32.f32 %v7816
  %v8329 = vcvt.s32.f32 %v7817
  %v8330 = vcvt.s32.f32 %v7818
  %v8331 = vcvt.s32.f32 %v7819
  %v8332 = vcvt.s32.f32 %v7820
  %v8333 = vcvt.s32.f32 %v7821
  %v8334 = vcvt.s32.f32 %v7822
  %v8335 = vcvt.s32.f32 %v7823
  %v8336 = vcvt.s32.f32 %v7824
  %v8337 = vcvt.s32.f32 %v7825
  %v8338 = vcvt.s32.f32 %v7826
  %v8339 = vcvt.s32.f32 %v7827
  %v8340 = vcvt.s32.f32 %v7828
  %v8341 = vcvt.s32.f32 %v7829
  %v8342 = vcvt.s32.f32 %v7830
  %v8343 = vcvt.s32.f32 %v7831
  %v8344 = vcvt.s32.f32 %v7832
  %v8345 = vcvt.s32.f32 %v7833
  %v8346 = vcvt.s32.f32 %v7834
  %v8347 = vcvt.s32.f32 %v7835
  %v8348 = vcvt.s32.f32 %v7836
  %v8349 = vcvt.s32.f32 %v7837
  %v8350 = vcvt.s32.f32 %v7838
  %v8351 = vcvt.s32.f32 %v7839
  %v8352 = vcvt.s32.f32 %v7840
  %v8353 = vcvt.s32.f32 %v7841
  %v8354 = vcvt.s32.f32 %v7842
  %v8355 = vcvt.s32.f32 %v7843
  %v8356 = vcvt.s32.f32 %v7844
  %v8357 = vcvt.s32.f32 %v7845
  %v8358 = vcvt.s32.f32 %v7846
  %v8359 = vcvt.s32.f32 %v7847
  %v8360 = vcvt.s32.f32 %v7848
  %v8361 = vcvt.s32.f32 %v7849
  %v8362 = vcvt.s32.f32 %v7850
  %v8363 = vcvt.s32.f32 %v7851
  %v8364 = vcvt.s32.f32 %v7852
  %v8365 = vcvt.s32.f32 %v7853
  %v8366 = vcvt.s32.f32 %v7854
  %v8367 = vcvt.s32.f32 %v7855
  %v8368 = vcvt.s32.f32 %v7856
  %v8369 = vcvt.s32.f32 %v7857
  %v8370 = vcvt.s32.f32 %v7858
  %v8371 = vcvt.s32.f32 %v7859
  %v8372 = vcvt.s32.f32 %v7860
  %v8373 = vcvt.s32.f32 %v7861
  %v8374 = vcvt.s32.f32 %v7862
  %v8375 = vcvt.s32.f32 %v7863
  %v8376 = vcvt.s32.f32 %v7864
  %v8377 = vcvt.s32.f32 %v7865
  %v8378 = vcvt.s32.f32 %v7866
  %v8379 = vcvt.s32.f32 %v7867
  %v8380 = vcvt.s32.f32 %v7868
  %v8381 = vcvt.s32.f32 %v7869
  %v8382 = vcvt.s32.f32 %v7870
  %v8383 = vcvt.s32.f32 %v7871
  %v8384 = vcvt.s32.f32 %v7872
  %v8385 = vcvt.s32.f32 %v7873
  %v8386 = vcvt.s32.f32 %v7874
  %v8387 = vcvt.s32.f32 %v7875
  %v8388 = vcvt.s32.f32 %v7876
  %v8389 = vcvt.s32.f32 %v7877
  %v8390 = vcvt.s32.f32 %v7878
  %v8391 = vcvt.s32.f32 %v7879
  %v8392 = vcvt.s32.f32 %v7880
  %v8393 = vcvt.s32.f32 %v7881
  %v8394 = vcvt.s32.f32 %v7882
  %v8395 = vcvt.s32.f32 %v7883
  %v8396 = vcvt.s32.f32 %v7884
  %v8397 = vcvt.s32.f32 %v7885
  %v8398 = vcvt.s32.f32 %v7886
  %v8399 = vcvt.s32.f32 %v7887
  %v8400 = vcvt.s32.f32 %v7888
  %v8401 = vcvt.s32.f32 %v7889
  %v8402 = vcvt.s32.f32 %v7890
  %v8403 = vcvt.s32.f32 %v7891
  %v8404 = vcvt.s32.f32 %v7892
  %v8405 = vcvt.s32.f32 %v7893
  %v8406 = vcvt.s32.f32 %v7894
  %v8407 = vcvt.s32.f32 %v7895
  %v8408 = vcvt.s32.f32 %v7896
  %v8409 = vcvt.s32.f32 %v7897
  %v8410 = vcvt.s32.f32 %v7898
  %v8411 = vcvt.s32.f32 %v7899
  %v8412 = vcvt.s32.f32 %v7900
  %v8413 = vcvt.s32.f32 %v7901
  %v8414 = vcvt.s32.f32 %v7902
  %v8415 = vcvt.s32.f32 %v7903
  %v8416 = vcvt.s32.f32 %v7904
  %v8417 = vcvt.s32.f32 %v7905
  %v8418 = vcvt.s32.f32 %v7906
  %v8419 = vcvt.s32.f32 %v7907
  %v8420 = vcvt.s32.f32 %v7908
  %v8421 = vcvt.s32.f32 %v7909
  %v8422 = vld [vmem:[%s1] sm:$0xff]
  %v8423 = vld [vmem:[%s1 + $0x8] sm:$0xff]
  %v8424 = vld [vmem:[%s1 + $0x10] sm:$0xff]
  %v8425 = vld [vmem:[%s1 + $0x18] sm:$0xff]
  %v8426 = vld [vmem:[%s1 + $0x20] sm:$0xff]
  %v8427 = vld [vmem:[%s1 + $0x28] sm:$0xff]
  %v8428 = vld [vmem:[%s1 + $0x30] sm:$0xff]
  %v8429 = vld [vmem:[%s1 + $0x38] sm:$0xff]
  %v8430 = vld [vmem:[%s1 + $0x40] sm:$0xff]
  %v8431 = vld [vmem:[%s1 + $0x48] sm:$0xff]
  %v8432 = vld [vmem:[%s1 + $0x50] sm:$0xff]
  %v8433 = vld [vmem:[%s1 + $0x58] sm:$0xff]
  %v8434 = vld [vmem:[%s1 + $0x60] sm:$0xff]
  %v8435 = vld [vmem:[%s1 + $0x68] sm:$0xff]
  %v8436 = vld [vmem:[%s1 + $0x70] sm:$0xff]
  %v8437 = vld [vmem:[%s1 + $0x78] sm:$0xff]
  %v8438 = vld [vmem:[%s1 + $0x80] sm:$0xff]
  %v8439 = vld [vmem:[%s1 + $0x88] sm:$0xff]
  %v8440 = vld [vmem:[%s1 + $0x90] sm:$0xff]
  %v8441 = vld [vmem:[%s1 + $0x98] sm:$0xff]
  %v8442 = vld [vmem:[%s1 + $0xa0] sm:$0xff]
  %v8443 = vld [vmem:[%s1 + $0xa8] sm:$0xff]
  %v8444 = vld [vmem:[%s1 + $0xb0] sm:$0xff]
  %v8445 = vld [vmem:[%s1 + $0xb8] sm:$0xff]
  %v8446 = vld [vmem:[%s1 + $0xc0] sm:$0xff]
  %v8447 = vld [vmem:[%s1 + $0xc8] sm:$0xff]
  %v8448 = vld [vmem:[%s1 + $0xd0] sm:$0xff]
  %v8449 = vld [vmem:[%s1 + $0xd8] sm:$0xff]
  %v8450 = vld [vmem:[%s1 + $0xe0] sm:$0xff]
  %v8451 = vld [vmem:[%s1 + $0xe8] sm:$0xff]
  %v8452 = vld [vmem:[%s1 + $0xf0] sm:$0xff]
  %v8453 = vld [vmem:[%s1 + $0xf8] sm:$0xff]
  %8454 = vxpose.xlu0.b32.start [1/16] %v7910, 128
  %8455 = vxpose.xlu0.b32.cont [2/16] %v7926, 128
  %8456 = vxpose.xlu0.b32.cont [3/16] %v7942, 128
  %8457 = vxpose.xlu0.b32.cont [4/16] %v7958, 128
  %8458 = vxpose.xlu0.b32.cont [5/16] %v7974, 128
  %8459 = vxpose.xlu0.b32.cont [6/16] %v7990, 128
  %8460 = vxpose.xlu0.b32.cont [7/16] %v8006, 128
  %8461 = vxpose.xlu0.b32.cont [8/16] %v8022, 128
  %8462 = vxpose.xlu0.b32.cont [9/16] %v8038, 128
  %8463 = vxpose.xlu0.b32.cont [10/16] %v8054, 128
  %8464 = vxpose.xlu0.b32.cont [11/16] %v8070, 128
  %8465 = vxpose.xlu0.b32.cont [12/16] %v8086, 128
  %8466 = vxpose.xlu0.b32.cont [13/16] %v8102, 128
  %8467 = vxpose.xlu0.b32.cont [14/16] %v8118, 128
  %8468 = vxpose.xlu0.b32.cont [15/16] %v8134, 128
  %8469 = vxpose.xlu0.b32.end [16/16] %v8150, 128
  %v8470 = vpop.trf.xlu0
  %v8471 = vpop.trf.xlu0
  %v8472 = vpop.trf.xlu0
  %v8473 = vpop.trf.xlu0
  %v8474 = vpop.trf.xlu0
  %v8475 = vpop.trf.xlu0
  %v8476 = vpop.trf.xlu0
  %v8477 = vpop.trf.xlu0
  %v8478 = vpop.trf.xlu0
  %v8479 = vpop.trf.xlu0
  %v8480 = vpop.trf.xlu0
  %v8481 = vpop.trf.xlu0
  %v8482 = vpop.trf.xlu0
  %v8483 = vpop.trf.xlu0
  %v8484 = vpop.trf.xlu0
  %v8485 = vpop.trf.xlu0
  %8486 = vxpose.xlu0.b32.start [1/16] %v7911, 128
  %8487 = vxpose.xlu0.b32.cont [2/16] %v7927, 128
  %8488 = vxpose.xlu0.b32.cont [3/16] %v7943, 128
  %8489 = vxpose.xlu0.b32.cont [4/16] %v7959, 128
  %8490 = vxpose.xlu0.b32.cont [5/16] %v7975, 128
  %8491 = vxpose.xlu0.b32.cont [6/16] %v7991, 128
  %8492 = vxpose.xlu0.b32.cont [7/16] %v8007, 128
  %8493 = vxpose.xlu0.b32.cont [8/16] %v8023, 128
  %8494 = vxpose.xlu0.b32.cont [9/16] %v8039, 128
  %8495 = vxpose.xlu0.b32.cont [10/16] %v8055, 128
  %8496 = vxpose.xlu0.b32.cont [11/16] %v8071, 128
  %8497 = vxpose.xlu0.b32.cont [12/16] %v8087, 128
  %8498 = vxpose.xlu0.b32.cont [13/16] %v8103, 128
  %8499 = vxpose.xlu0.b32.cont [14/16] %v8119, 128
  %8500 = vxpose.xlu0.b32.cont [15/16] %v8135, 128
  %8501 = vxpose.xlu0.b32.end [16/16] %v8151, 128
  %v8502 = vpop.trf.xlu0
  %v8503 = vpop.trf.xlu0
  %v8504 = vpop.trf.xlu0
  %v8505 = vpop.trf.xlu0
  %v8506 = vpop.trf.xlu0
  %v8507 = vpop.trf.xlu0
  %v8508 = vpop.trf.xlu0
  %v8509 = vpop.trf.xlu0
  %v8510 = vpop.trf.xlu0
  %v8511 = vpop.trf.xlu0
  %v8512 = vpop.trf.xlu0
  %v8513 = vpop.trf.xlu0
  %v8514 = vpop.trf.xlu0
  %v8515 = vpop.trf.xlu0
  %v8516 = vpop.trf.xlu0
  %v8517 = vpop.trf.xlu0
  %8518 = vxpose.xlu0.b32.start [1/16] %v7912, 128
  %8519 = vxpose.xlu0.b32.cont [2/16] %v7928, 128
  %8520 = vxpose.xlu0.b32.cont [3/16] %v7944, 128
  %8521 = vxpose.xlu0.b32.cont [4/16] %v7960, 128
  %8522 = vxpose.xlu0.b32.cont [5/16] %v7976, 128
  %8523 = vxpose.xlu0.b32.cont [6/16] %v7992, 128
  %8524 = vxpose.xlu0.b32.cont [7/16] %v8008, 128
  %8525 = vxpose.xlu0.b32.cont [8/16] %v8024, 128
  %8526 = vxpose.xlu0.b32.cont [9/16] %v8040, 128
  %8527 = vxpose.xlu0.b32.cont [10/16] %v8056, 128
  %8528 = vxpose.xlu0.b32.cont [11/16] %v8072, 128
  %8529 = vxpose.xlu0.b32.cont [12/16] %v8088, 128
  %8530 = vxpose.xlu0.b32.cont [13/16] %v8104, 128
  %8531 = vxpose.xlu0.b32.cont [14/16] %v8120, 128
  %8532 = vxpose.xlu0.b32.cont [15/16] %v8136, 128
  %8533 = vxpose.xlu0.b32.end [16/16] %v8152, 128
  %v8534 = vpop.trf.xlu0
  %v8535 = vpop.trf.xlu0
  %v8536 = vpop.trf.xlu0
  %v8537 = vpop.trf.xlu0
  %v8538 = vpop.trf.xlu0
  %v8539 = vpop.trf.xlu0
  %v8540 = vpop.trf.xlu0
  %v8541 = vpop.trf.xlu0
  %v8542 = vpop.trf.xlu0
  %v8543 = vpop.trf.xlu0
  %v8544 = vpop.trf.xlu0
  %v8545 = vpop.trf.xlu0
  %v8546 = vpop.trf.xlu0
  %v8547 = vpop.trf.xlu0
  %v8548 = vpop.trf.xlu0
  %v8549 = vpop.trf.xlu0
  %8550 = vxpose.xlu0.b32.start [1/16] %v7913, 128
  %8551 = vxpose.xlu0.b32.cont [2/16] %v7929, 128
  %8552 = vxpose.xlu0.b32.cont [3/16] %v7945, 128
  %8553 = vxpose.xlu0.b32.cont [4/16] %v7961, 128
  %8554 = vxpose.xlu0.b32.cont [5/16] %v7977, 128
  %8555 = vxpose.xlu0.b32.cont [6/16] %v7993, 128
  %8556 = vxpose.xlu0.b32.cont [7/16] %v8009, 128
  %8557 = vxpose.xlu0.b32.cont [8/16] %v8025, 128
  %8558 = vxpose.xlu0.b32.cont [9/16] %v8041, 128
  %8559 = vxpose.xlu0.b32.cont [10/16] %v8057, 128
  %8560 = vxpose.xlu0.b32.cont [11/16] %v8073, 128
  %8561 = vxpose.xlu0.b32.cont [12/16] %v8089, 128
  %8562 = vxpose.xlu0.b32.cont [13/16] %v8105, 128
  %8563 = vxpose.xlu0.b32.cont [14/16] %v8121, 128
  %8564 = vxpose.xlu0.b32.cont [15/16] %v8137, 128
  %8565 = vxpose.xlu0.b32.end [16/16] %v8153, 128
  %v8566 = vpop.trf.xlu0
  %v8567 = vpop.trf.xlu0
  %v8568 = vpop.trf.xlu0
  %v8569 = vpop.trf.xlu0
  %v8570 = vpop.trf.xlu0
  %v8571 = vpop.trf.xlu0
  %v8572 = vpop.trf.xlu0
  %v8573 = vpop.trf.xlu0
  %v8574 = vpop.trf.xlu0
  %v8575 = vpop.trf.xlu0
  %v8576 = vpop.trf.xlu0
  %v8577 = vpop.trf.xlu0
  %v8578 = vpop.trf.xlu0
  %v8579 = vpop.trf.xlu0
  %v8580 = vpop.trf.xlu0
  %v8581 = vpop.trf.xlu0
  %8582 = vxpose.xlu0.b32.start [1/16] %v7914, 128
  %8583 = vxpose.xlu0.b32.cont [2/16] %v7930, 128
  %8584 = vxpose.xlu0.b32.cont [3/16] %v7946, 128
  %8585 = vxpose.xlu0.b32.cont [4/16] %v7962, 128
  %8586 = vxpose.xlu0.b32.cont [5/16] %v7978, 128
  %8587 = vxpose.xlu0.b32.cont [6/16] %v7994, 128
  %8588 = vxpose.xlu0.b32.cont [7/16] %v8010, 128
  %8589 = vxpose.xlu0.b32.cont [8/16] %v8026, 128
  %8590 = vxpose.xlu0.b32.cont [9/16] %v8042, 128
  %8591 = vxpose.xlu0.b32.cont [10/16] %v8058, 128
  %8592 = vxpose.xlu0.b32.cont [11/16] %v8074, 128
  %8593 = vxpose.xlu0.b32.cont [12/16] %v8090, 128
  %8594 = vxpose.xlu0.b32.cont [13/16] %v8106, 128
  %8595 = vxpose.xlu0.b32.cont [14/16] %v8122, 128
  %8596 = vxpose.xlu0.b32.cont [15/16] %v8138, 128
  %8597 = vxpose.xlu0.b32.end [16/16] %v8154, 128
  %v8598 = vpop.trf.xlu0
  %v8599 = vpop.trf.xlu0
  %v8600 = vpop.trf.xlu0
  %v8601 = vpop.trf.xlu0
  %v8602 = vpop.trf.xlu0
  %v8603 = vpop.trf.xlu0
  %v8604 = vpop.trf.xlu0
  %v8605 = vpop.trf.xlu0
  %v8606 = vpop.trf.xlu0
  %v8607 = vpop.trf.xlu0
  %v8608 = vpop.trf.xlu0
  %v8609 = vpop.trf.xlu0
  %v8610 = vpop.trf.xlu0
  %v8611 = vpop.trf.xlu0
  %v8612 = vpop.trf.xlu0
  %v8613 = vpop.trf.xlu0
  %8614 = vxpose.xlu0.b32.start [1/16] %v7915, 128
  %8615 = vxpose.xlu0.b32.cont [2/16] %v7931, 128
  %8616 = vxpose.xlu0.b32.cont [3/16] %v7947, 128
  %8617 = vxpose.xlu0.b32.cont [4/16] %v7963, 128
  %8618 = vxpose.xlu0.b32.cont [5/16] %v7979, 128
  %8619 = vxpose.xlu0.b32.cont [6/16] %v7995, 128
  %8620 = vxpose.xlu0.b32.cont [7/16] %v8011, 128
  %8621 = vxpose.xlu0.b32.cont [8/16] %v8027, 128
  %8622 = vxpose.xlu0.b32.cont [9/16] %v8043, 128
  %8623 = vxpose.xlu0.b32.cont [10/16] %v8059, 128
  %8624 = vxpose.xlu0.b32.cont [11/16] %v8075, 128
  %8625 = vxpose.xlu0.b32.cont [12/16] %v8091, 128
  %8626 = vxpose.xlu0.b32.cont [13/16] %v8107, 128
  %8627 = vxpose.xlu0.b32.cont [14/16] %v8123, 128
  %8628 = vxpose.xlu0.b32.cont [15/16] %v8139, 128
  %8629 = vxpose.xlu0.b32.end [16/16] %v8155, 128
  %v8630 = vpop.trf.xlu0
  %v8631 = vpop.trf.xlu0
  %v8632 = vpop.trf.xlu0
  %v8633 = vpop.trf.xlu0
  %v8634 = vpop.trf.xlu0
  %v8635 = vpop.trf.xlu0
  %v8636 = vpop.trf.xlu0
  %v8637 = vpop.trf.xlu0
  %v8638 = vpop.trf.xlu0
  %v8639 = vpop.trf.xlu0
  %v8640 = vpop.trf.xlu0
  %v8641 = vpop.trf.xlu0
  %v8642 = vpop.trf.xlu0
  %v8643 = vpop.trf.xlu0
  %v8644 = vpop.trf.xlu0
  %v8645 = vpop.trf.xlu0
  %8646 = vxpose.xlu0.b32.start [1/16] %v7916, 128
  %8647 = vxpose.xlu0.b32.cont [2/16] %v7932, 128
  %8648 = vxpose.xlu0.b32.cont [3/16] %v7948, 128
  %8649 = vxpose.xlu0.b32.cont [4/16] %v7964, 128
  %8650 = vxpose.xlu0.b32.cont [5/16] %v7980, 128
  %8651 = vxpose.xlu0.b32.cont [6/16] %v7996, 128
  %8652 = vxpose.xlu0.b32.cont [7/16] %v8012, 128
  %8653 = vxpose.xlu0.b32.cont [8/16] %v8028, 128
  %8654 = vxpose.xlu0.b32.cont [9/16] %v8044, 128
  %8655 = vxpose.xlu0.b32.cont [10/16] %v8060, 128
  %8656 = vxpose.xlu0.b32.cont [11/16] %v8076, 128
  %8657 = vxpose.xlu0.b32.cont [12/16] %v8092, 128
  %8658 = vxpose.xlu0.b32.cont [13/16] %v8108, 128
  %8659 = vxpose.xlu0.b32.cont [14/16] %v8124, 128
  %8660 = vxpose.xlu0.b32.cont [15/16] %v8140, 128
  %8661 = vxpose.xlu0.b32.end [16/16] %v8156, 128
  %v8662 = vpop.trf.xlu0
  %v8663 = vpop.trf.xlu0
  %v8664 = vpop.trf.xlu0
  %v8665 = vpop.trf.xlu0
  %v8666 = vpop.trf.xlu0
  %v8667 = vpop.trf.xlu0
  %v8668 = vpop.trf.xlu0
  %v8669 = vpop.trf.xlu0
  %v8670 = vpop.trf.xlu0
  %v8671 = vpop.trf.xlu0
  %v8672 = vpop.trf.xlu0
  %v8673 = vpop.trf.xlu0
  %v8674 = vpop.trf.xlu0
  %v8675 = vpop.trf.xlu0
  %v8676 = vpop.trf.xlu0
  %v8677 = vpop.trf.xlu0
  %8678 = vxpose.xlu0.b32.start [1/16] %v7917, 128
  %8679 = vxpose.xlu0.b32.cont [2/16] %v7933, 128
  %8680 = vxpose.xlu0.b32.cont [3/16] %v7949, 128
  %8681 = vxpose.xlu0.b32.cont [4/16] %v7965, 128
  %8682 = vxpose.xlu0.b32.cont [5/16] %v7981, 128
  %8683 = vxpose.xlu0.b32.cont [6/16] %v7997, 128
  %8684 = vxpose.xlu0.b32.cont [7/16] %v8013, 128
  %8685 = vxpose.xlu0.b32.cont [8/16] %v8029, 128
  %8686 = vxpose.xlu0.b32.cont [9/16] %v8045, 128
  %8687 = vxpose.xlu0.b32.cont [10/16] %v8061, 128
  %8688 = vxpose.xlu0.b32.cont [11/16] %v8077, 128
  %8689 = vxpose.xlu0.b32.cont [12/16] %v8093, 128
  %8690 = vxpose.xlu0.b32.cont [13/16] %v8109, 128
  %8691 = vxpose.xlu0.b32.cont [14/16] %v8125, 128
  %8692 = vxpose.xlu0.b32.cont [15/16] %v8141, 128
  %8693 = vxpose.xlu0.b32.end [16/16] %v8157, 128
  %v8694 = vpop.trf.xlu0
  %v8695 = vpop.trf.xlu0
  %v8696 = vpop.trf.xlu0
  %v8697 = vpop.trf.xlu0
  %v8698 = vpop.trf.xlu0
  %v8699 = vpop.trf.xlu0
  %v8700 = vpop.trf.xlu0
  %v8701 = vpop.trf.xlu0
  %v8702 = vpop.trf.xlu0
  %v8703 = vpop.trf.xlu0
  %v8704 = vpop.trf.xlu0
  %v8705 = vpop.trf.xlu0
  %v8706 = vpop.trf.xlu0
  %v8707 = vpop.trf.xlu0
  %v8708 = vpop.trf.xlu0
  %v8709 = vpop.trf.xlu0
  %8710 = vxpose.xlu0.b32.start [1/16] %v7918, 128
  %8711 = vxpose.xlu0.b32.cont [2/16] %v7934, 128
  %8712 = vxpose.xlu0.b32.cont [3/16] %v7950, 128
  %8713 = vxpose.xlu0.b32.cont [4/16] %v7966, 128
  %8714 = vxpose.xlu0.b32.cont [5/16] %v7982, 128
  %8715 = vxpose.xlu0.b32.cont [6/16] %v7998, 128
  %8716 = vxpose.xlu0.b32.cont [7/16] %v8014, 128
  %8717 = vxpose.xlu0.b32.cont [8/16] %v8030, 128
  %8718 = vxpose.xlu0.b32.cont [9/16] %v8046, 128
  %8719 = vxpose.xlu0.b32.cont [10/16] %v8062, 128
  %8720 = vxpose.xlu0.b32.cont [11/16] %v8078, 128
  %8721 = vxpose.xlu0.b32.cont [12/16] %v8094, 128
  %8722 = vxpose.xlu0.b32.cont [13/16] %v8110, 128
  %8723 = vxpose.xlu0.b32.cont [14/16] %v8126, 128
  %8724 = vxpose.xlu0.b32.cont [15/16] %v8142, 128
  %8725 = vxpose.xlu0.b32.end [16/16] %v8158, 128
  %v8726 = vpop.trf.xlu0
  %v8727 = vpop.trf.xlu0
  %v8728 = vpop.trf.xlu0
  %v8729 = vpop.trf.xlu0
  %v8730 = vpop.trf.xlu0
  %v8731 = vpop.trf.xlu0
  %v8732 = vpop.trf.xlu0
  %v8733 = vpop.trf.xlu0
  %v8734 = vpop.trf.xlu0
  %v8735 = vpop.trf.xlu0
  %v8736 = vpop.trf.xlu0
  %v8737 = vpop.trf.xlu0
  %v8738 = vpop.trf.xlu0
  %v8739 = vpop.trf.xlu0
  %v8740 = vpop.trf.xlu0
  %v8741 = vpop.trf.xlu0
  %8742 = vxpose.xlu0.b32.start [1/16] %v7919, 128
  %8743 = vxpose.xlu0.b32.cont [2/16] %v7935, 128
  %8744 = vxpose.xlu0.b32.cont [3/16] %v7951, 128
  %8745 = vxpose.xlu0.b32.cont [4/16] %v7967, 128
  %8746 = vxpose.xlu0.b32.cont [5/16] %v7983, 128
  %8747 = vxpose.xlu0.b32.cont [6/16] %v7999, 128
  %8748 = vxpose.xlu0.b32.cont [7/16] %v8015, 128
  %8749 = vxpose.xlu0.b32.cont [8/16] %v8031, 128
  %8750 = vxpose.xlu0.b32.cont [9/16] %v8047, 128
  %8751 = vxpose.xlu0.b32.cont [10/16] %v8063, 128
  %8752 = vxpose.xlu0.b32.cont [11/16] %v8079, 128
  %8753 = vxpose.xlu0.b32.cont [12/16] %v8095, 128
  %8754 = vxpose.xlu0.b32.cont [13/16] %v8111, 128
  %8755 = vxpose.xlu0.b32.cont [14/16] %v8127, 128
  %8756 = vxpose.xlu0.b32.cont [15/16] %v8143, 128
  %8757 = vxpose.xlu0.b32.end [16/16] %v8159, 128
  %v8758 = vpop.trf.xlu0
  %v8759 = vpop.trf.xlu0
  %v8760 = vpop.trf.xlu0
  %v8761 = vpop.trf.xlu0
  %v8762 = vpop.trf.xlu0
  %v8763 = vpop.trf.xlu0
  %v8764 = vpop.trf.xlu0
  %v8765 = vpop.trf.xlu0
  %v8766 = vpop.trf.xlu0
  %v8767 = vpop.trf.xlu0
  %v8768 = vpop.trf.xlu0
  %v8769 = vpop.trf.xlu0
  %v8770 = vpop.trf.xlu0
  %v8771 = vpop.trf.xlu0
  %v8772 = vpop.trf.xlu0
  %v8773 = vpop.trf.xlu0
  %8774 = vxpose.xlu0.b32.start [1/16] %v7920, 128
  %8775 = vxpose.xlu0.b32.cont [2/16] %v7936, 128
  %8776 = vxpose.xlu0.b32.cont [3/16] %v7952, 128
  %8777 = vxpose.xlu0.b32.cont [4/16] %v7968, 128
  %8778 = vxpose.xlu0.b32.cont [5/16] %v7984, 128
  %8779 = vxpose.xlu0.b32.cont [6/16] %v8000, 128
  %8780 = vxpose.xlu0.b32.cont [7/16] %v8016, 128
  %8781 = vxpose.xlu0.b32.cont [8/16] %v8032, 128
  %8782 = vxpose.xlu0.b32.cont [9/16] %v8048, 128
  %8783 = vxpose.xlu0.b32.cont [10/16] %v8064, 128
  %8784 = vxpose.xlu0.b32.cont [11/16] %v8080, 128
  %8785 = vxpose.xlu0.b32.cont [12/16] %v8096, 128
  %8786 = vxpose.xlu0.b32.cont [13/16] %v8112, 128
  %8787 = vxpose.xlu0.b32.cont [14/16] %v8128, 128
  %8788 = vxpose.xlu0.b32.cont [15/16] %v8144, 128
  %8789 = vxpose.xlu0.b32.end [16/16] %v8160, 128
  %v8790 = vpop.trf.xlu0
  %v8791 = vpop.trf.xlu0
  %v8792 = vpop.trf.xlu0
  %v8793 = vpop.trf.xlu0
  %v8794 = vpop.trf.xlu0
  %v8795 = vpop.trf.xlu0
  %v8796 = vpop.trf.xlu0
  %v8797 = vpop.trf.xlu0
  %v8798 = vpop.trf.xlu0
  %v8799 = vpop.trf.xlu0
  %v8800 = vpop.trf.xlu0
  %v8801 = vpop.trf.xlu0
  %v8802 = vpop.trf.xlu0
  %v8803 = vpop.trf.xlu0
  %v8804 = vpop.trf.xlu0
  %v8805 = vpop.trf.xlu0
  %8806 = vxpose.xlu0.b32.start [1/16] %v7921, 128
  %8807 = vxpose.xlu0.b32.cont [2/16] %v7937, 128
  %8808 = vxpose.xlu0.b32.cont [3/16] %v7953, 128
  %8809 = vxpose.xlu0.b32.cont [4/16] %v7969, 128
  %8810 = vxpose.xlu0.b32.cont [5/16] %v7985, 128
  %8811 = vxpose.xlu0.b32.cont [6/16] %v8001, 128
  %8812 = vxpose.xlu0.b32.cont [7/16] %v8017, 128
  %8813 = vxpose.xlu0.b32.cont [8/16] %v8033, 128
  %8814 = vxpose.xlu0.b32.cont [9/16] %v8049, 128
  %8815 = vxpose.xlu0.b32.cont [10/16] %v8065, 128
  %8816 = vxpose.xlu0.b32.cont [11/16] %v8081, 128
  %8817 = vxpose.xlu0.b32.cont [12/16] %v8097, 128
  %8818 = vxpose.xlu0.b32.cont [13/16] %v8113, 128
  %8819 = vxpose.xlu0.b32.cont [14/16] %v8129, 128
  %8820 = vxpose.xlu0.b32.cont [15/16] %v8145, 128
  %8821 = vxpose.xlu0.b32.end [16/16] %v8161, 128
  %v8822 = vpop.trf.xlu0
  %v8823 = vpop.trf.xlu0
  %v8824 = vpop.trf.xlu0
  %v8825 = vpop.trf.xlu0
  %v8826 = vpop.trf.xlu0
  %v8827 = vpop.trf.xlu0
  %v8828 = vpop.trf.xlu0
  %v8829 = vpop.trf.xlu0
  %v8830 = vpop.trf.xlu0
  %v8831 = vpop.trf.xlu0
  %v8832 = vpop.trf.xlu0
  %v8833 = vpop.trf.xlu0
  %v8834 = vpop.trf.xlu0
  %v8835 = vpop.trf.xlu0
  %v8836 = vpop.trf.xlu0
  %v8837 = vpop.trf.xlu0
  %8838 = vxpose.xlu0.b32.start [1/16] %v7922, 128
  %8839 = vxpose.xlu0.b32.cont [2/16] %v7938, 128
  %8840 = vxpose.xlu0.b32.cont [3/16] %v7954, 128
  %8841 = vxpose.xlu0.b32.cont [4/16] %v7970, 128
  %8842 = vxpose.xlu0.b32.cont [5/16] %v7986, 128
  %8843 = vxpose.xlu0.b32.cont [6/16] %v8002, 128
  %8844 = vxpose.xlu0.b32.cont [7/16] %v8018, 128
  %8845 = vxpose.xlu0.b32.cont [8/16] %v8034, 128
  %8846 = vxpose.xlu0.b32.cont [9/16] %v8050, 128
  %8847 = vxpose.xlu0.b32.cont [10/16] %v8066, 128
  %8848 = vxpose.xlu0.b32.cont [11/16] %v8082, 128
  %8849 = vxpose.xlu0.b32.cont [12/16] %v8098, 128
  %8850 = vxpose.xlu0.b32.cont [13/16] %v8114, 128
  %8851 = vxpose.xlu0.b32.cont [14/16] %v8130, 128
  %8852 = vxpose.xlu0.b32.cont [15/16] %v8146, 128
  %8853 = vxpose.xlu0.b32.end [16/16] %v8162, 128
  %v8854 = vpop.trf.xlu0
  %v8855 = vpop.trf.xlu0
  %v8856 = vpop.trf.xlu0
  %v8857 = vpop.trf.xlu0
  %v8858 = vpop.trf.xlu0
  %v8859 = vpop.trf.xlu0
  %v8860 = vpop.trf.xlu0
  %v8861 = vpop.trf.xlu0
  %v8862 = vpop.trf.xlu0
  %v8863 = vpop.trf.xlu0
  %v8864 = vpop.trf.xlu0
  %v8865 = vpop.trf.xlu0
  %v8866 = vpop.trf.xlu0
  %v8867 = vpop.trf.xlu0
  %v8868 = vpop.trf.xlu0
  %v8869 = vpop.trf.xlu0
  %8870 = vxpose.xlu0.b32.start [1/16] %v7923, 128
  %8871 = vxpose.xlu0.b32.cont [2/16] %v7939, 128
  %8872 = vxpose.xlu0.b32.cont [3/16] %v7955, 128
  %8873 = vxpose.xlu0.b32.cont [4/16] %v7971, 128
  %8874 = vxpose.xlu0.b32.cont [5/16] %v7987, 128
  %8875 = vxpose.xlu0.b32.cont [6/16] %v8003, 128
  %8876 = vxpose.xlu0.b32.cont [7/16] %v8019, 128
  %8877 = vxpose.xlu0.b32.cont [8/16] %v8035, 128
  %8878 = vxpose.xlu0.b32.cont [9/16] %v8051, 128
  %8879 = vxpose.xlu0.b32.cont [10/16] %v8067, 128
  %8880 = vxpose.xlu0.b32.cont [11/16] %v8083, 128
  %8881 = vxpose.xlu0.b32.cont [12/16] %v8099, 128
  %8882 = vxpose.xlu0.b32.cont [13/16] %v8115, 128
  %8883 = vxpose.xlu0.b32.cont [14/16] %v8131, 128
  %8884 = vxpose.xlu0.b32.cont [15/16] %v8147, 128
  %8885 = vxpose.xlu0.b32.end [16/16] %v8163, 128
  %v8886 = vpop.trf.xlu0
  %v8887 = vpop.trf.xlu0
  %v8888 = vpop.trf.xlu0
  %v8889 = vpop.trf.xlu0
  %v8890 = vpop.trf.xlu0
  %v8891 = vpop.trf.xlu0
  %v8892 = vpop.trf.xlu0
  %v8893 = vpop.trf.xlu0
  %v8894 = vpop.trf.xlu0
  %v8895 = vpop.trf.xlu0
  %v8896 = vpop.trf.xlu0
  %v8897 = vpop.trf.xlu0
  %v8898 = vpop.trf.xlu0
  %v8899 = vpop.trf.xlu0
  %v8900 = vpop.trf.xlu0
  %v8901 = vpop.trf.xlu0
  %8902 = vxpose.xlu0.b32.start [1/16] %v7924, 128
  %8903 = vxpose.xlu0.b32.cont [2/16] %v7940, 128
  %8904 = vxpose.xlu0.b32.cont [3/16] %v7956, 128
  %8905 = vxpose.xlu0.b32.cont [4/16] %v7972, 128
  %8906 = vxpose.xlu0.b32.cont [5/16] %v7988, 128
  %8907 = vxpose.xlu0.b32.cont [6/16] %v8004, 128
  %8908 = vxpose.xlu0.b32.cont [7/16] %v8020, 128
  %8909 = vxpose.xlu0.b32.cont [8/16] %v8036, 128
  %8910 = vxpose.xlu0.b32.cont [9/16] %v8052, 128
  %8911 = vxpose.xlu0.b32.cont [10/16] %v8068, 128
  %8912 = vxpose.xlu0.b32.cont [11/16] %v8084, 128
  %8913 = vxpose.xlu0.b32.cont [12/16] %v8100, 128
  %8914 = vxpose.xlu0.b32.cont [13/16] %v8116, 128
  %8915 = vxpose.xlu0.b32.cont [14/16] %v8132, 128
  %8916 = vxpose.xlu0.b32.cont [15/16] %v8148, 128
  %8917 = vxpose.xlu0.b32.end [16/16] %v8164, 128
  %v8918 = vpop.trf.xlu0
  %v8919 = vpop.trf.xlu0
  %v8920 = vpop.trf.xlu0
  %v8921 = vpop.trf.xlu0
  %v8922 = vpop.trf.xlu0
  %v8923 = vpop.trf.xlu0
  %v8924 = vpop.trf.xlu0
  %v8925 = vpop.trf.xlu0
  %v8926 = vpop.trf.xlu0
  %v8927 = vpop.trf.xlu0
  %v8928 = vpop.trf.xlu0
  %v8929 = vpop.trf.xlu0
  %v8930 = vpop.trf.xlu0
  %v8931 = vpop.trf.xlu0
  %v8932 = vpop.trf.xlu0
  %v8933 = vpop.trf.xlu0
  %8934 = vxpose.xlu0.b32.start [1/16] %v7925, 128
  %8935 = vxpose.xlu0.b32.cont [2/16] %v7941, 128
  %8936 = vxpose.xlu0.b32.cont [3/16] %v7957, 128
  %8937 = vxpose.xlu0.b32.cont [4/16] %v7973, 128
  %8938 = vxpose.xlu0.b32.cont [5/16] %v7989, 128
  %8939 = vxpose.xlu0.b32.cont [6/16] %v8005, 128
  %8940 = vxpose.xlu0.b32.cont [7/16] %v8021, 128
  %8941 = vxpose.xlu0.b32.cont [8/16] %v8037, 128
  %8942 = vxpose.xlu0.b32.cont [9/16] %v8053, 128
  %8943 = vxpose.xlu0.b32.cont [10/16] %v8069, 128
  %8944 = vxpose.xlu0.b32.cont [11/16] %v8085, 128
  %8945 = vxpose.xlu0.b32.cont [12/16] %v8101, 128
  %8946 = vxpose.xlu0.b32.cont [13/16] %v8117, 128
  %8947 = vxpose.xlu0.b32.cont [14/16] %v8133, 128
  %8948 = vxpose.xlu0.b32.cont [15/16] %v8149, 128
  %8949 = vxpose.xlu0.b32.end [16/16] %v8165, 128
  %v8950 = vpop.trf.xlu0
  %v8951 = vpop.trf.xlu0
  %v8952 = vpop.trf.xlu0
  %v8953 = vpop.trf.xlu0
  %v8954 = vpop.trf.xlu0
  %v8955 = vpop.trf.xlu0
  %v8956 = vpop.trf.xlu0
  %v8957 = vpop.trf.xlu0
  %v8958 = vpop.trf.xlu0
  %v8959 = vpop.trf.xlu0
  %v8960 = vpop.trf.xlu0
  %v8961 = vpop.trf.xlu0
  %v8962 = vpop.trf.xlu0
  %v8963 = vpop.trf.xlu0
  %v8964 = vpop.trf.xlu0
  %v8965 = vpop.trf.xlu0
  %8966 = vxpose.xlu0.b32.start [1/16] %v8166, 128
  %8967 = vxpose.xlu0.b32.cont [2/16] %v8182, 128
  %8968 = vxpose.xlu0.b32.cont [3/16] %v8198, 128
  %8969 = vxpose.xlu0.b32.cont [4/16] %v8214, 128
  %8970 = vxpose.xlu0.b32.cont [5/16] %v8230, 128
  %8971 = vxpose.xlu0.b32.cont [6/16] %v8246, 128
  %8972 = vxpose.xlu0.b32.cont [7/16] %v8262, 128
  %8973 = vxpose.xlu0.b32.cont [8/16] %v8278, 128
  %8974 = vxpose.xlu0.b32.cont [9/16] %v8294, 128
  %8975 = vxpose.xlu0.b32.cont [10/16] %v8310, 128
  %8976 = vxpose.xlu0.b32.cont [11/16] %v8326, 128
  %8977 = vxpose.xlu0.b32.cont [12/16] %v8342, 128
  %8978 = vxpose.xlu0.b32.cont [13/16] %v8358, 128
  %8979 = vxpose.xlu0.b32.cont [14/16] %v8374, 128
  %8980 = vxpose.xlu0.b32.cont [15/16] %v8390, 128
  %8981 = vxpose.xlu0.b32.end [16/16] %v8406, 128
  %v8982 = vpop.trf.xlu0
  %v8983 = vpop.trf.xlu0
  %v8984 = vpop.trf.xlu0
  %v8985 = vpop.trf.xlu0
  %v8986 = vpop.trf.xlu0
  %v8987 = vpop.trf.xlu0
  %v8988 = vpop.trf.xlu0
  %v8989 = vpop.trf.xlu0
  %v8990 = vpop.trf.xlu0
  %v8991 = vpop.trf.xlu0
  %v8992 = vpop.trf.xlu0
  %v8993 = vpop.trf.xlu0
  %v8994 = vpop.trf.xlu0
  %v8995 = vpop.trf.xlu0
  %v8996 = vpop.trf.xlu0
  %v8997 = vpop.trf.xlu0
  %8998 = vxpose.xlu0.b32.start [1/16] %v8167, 128
  %8999 = vxpose.xlu0.b32.cont [2/16] %v8183, 128
  %9000 = vxpose.xlu0.b32.cont [3/16] %v8199, 128
  %9001 = vxpose.xlu0.b32.cont [4/16] %v8215, 128
  %9002 = vxpose.xlu0.b32.cont [5/16] %v8231, 128
  %9003 = vxpose.xlu0.b32.cont [6/16] %v8247, 128
  %9004 = vxpose.xlu0.b32.cont [7/16] %v8263, 128
  %9005 = vxpose.xlu0.b32.cont [8/16] %v8279, 128
  %9006 = vxpose.xlu0.b32.cont [9/16] %v8295, 128
  %9007 = vxpose.xlu0.b32.cont [10/16] %v8311, 128
  %9008 = vxpose.xlu0.b32.cont [11/16] %v8327, 128
  %9009 = vxpose.xlu0.b32.cont [12/16] %v8343, 128
  %9010 = vxpose.xlu0.b32.cont [13/16] %v8359, 128
  %9011 = vxpose.xlu0.b32.cont [14/16] %v8375, 128
  %9012 = vxpose.xlu0.b32.cont [15/16] %v8391, 128
  %9013 = vxpose.xlu0.b32.end [16/16] %v8407, 128
  %v9014 = vpop.trf.xlu0
  %v9015 = vpop.trf.xlu0
  %v9016 = vpop.trf.xlu0
  %v9017 = vpop.trf.xlu0
  %v9018 = vpop.trf.xlu0
  %v9019 = vpop.trf.xlu0
  %v9020 = vpop.trf.xlu0
  %v9021 = vpop.trf.xlu0
  %v9022 = vpop.trf.xlu0
  %v9023 = vpop.trf.xlu0
  %v9024 = vpop.trf.xlu0
  %v9025 = vpop.trf.xlu0
  %v9026 = vpop.trf.xlu0
  %v9027 = vpop.trf.xlu0
  %v9028 = vpop.trf.xlu0
  %v9029 = vpop.trf.xlu0
  %9030 = vxpose.xlu0.b32.start [1/16] %v8168, 128
  %9031 = vxpose.xlu0.b32.cont [2/16] %v8184, 128
  %9032 = vxpose.xlu0.b32.cont [3/16] %v8200, 128
  %9033 = vxpose.xlu0.b32.cont [4/16] %v8216, 128
  %9034 = vxpose.xlu0.b32.cont [5/16] %v8232, 128
  %9035 = vxpose.xlu0.b32.cont [6/16] %v8248, 128
  %9036 = vxpose.xlu0.b32.cont [7/16] %v8264, 128
  %9037 = vxpose.xlu0.b32.cont [8/16] %v8280, 128
  %9038 = vxpose.xlu0.b32.cont [9/16] %v8296, 128
  %9039 = vxpose.xlu0.b32.cont [10/16] %v8312, 128
  %9040 = vxpose.xlu0.b32.cont [11/16] %v8328, 128
  %9041 = vxpose.xlu0.b32.cont [12/16] %v8344, 128
  %9042 = vxpose.xlu0.b32.cont [13/16] %v8360, 128
  %9043 = vxpose.xlu0.b32.cont [14/16] %v8376, 128
  %9044 = vxpose.xlu0.b32.cont [15/16] %v8392, 128
  %9045 = vxpose.xlu0.b32.end [16/16] %v8408, 128
  %v9046 = vpop.trf.xlu0
  %v9047 = vpop.trf.xlu0
  %v9048 = vpop.trf.xlu0
  %v9049 = vpop.trf.xlu0
  %v9050 = vpop.trf.xlu0
  %v9051 = vpop.trf.xlu0
  %v9052 = vpop.trf.xlu0
  %v9053 = vpop.trf.xlu0
  %v9054 = vpop.trf.xlu0
  %v9055 = vpop.trf.xlu0
  %v9056 = vpop.trf.xlu0
  %v9057 = vpop.trf.xlu0
  %v9058 = vpop.trf.xlu0
  %v9059 = vpop.trf.xlu0
  %v9060 = vpop.trf.xlu0
  %v9061 = vpop.trf.xlu0
  %9062 = vxpose.xlu0.b32.start [1/16] %v8169, 128
  %9063 = vxpose.xlu0.b32.cont [2/16] %v8185, 128
  %9064 = vxpose.xlu0.b32.cont [3/16] %v8201, 128
  %9065 = vxpose.xlu0.b32.cont [4/16] %v8217, 128
  %9066 = vxpose.xlu0.b32.cont [5/16] %v8233, 128
  %9067 = vxpose.xlu0.b32.cont [6/16] %v8249, 128
  %9068 = vxpose.xlu0.b32.cont [7/16] %v8265, 128
  %9069 = vxpose.xlu0.b32.cont [8/16] %v8281, 128
  %9070 = vxpose.xlu0.b32.cont [9/16] %v8297, 128
  %9071 = vxpose.xlu0.b32.cont [10/16] %v8313, 128
  %9072 = vxpose.xlu0.b32.cont [11/16] %v8329, 128
  %9073 = vxpose.xlu0.b32.cont [12/16] %v8345, 128
  %9074 = vxpose.xlu0.b32.cont [13/16] %v8361, 128
  %9075 = vxpose.xlu0.b32.cont [14/16] %v8377, 128
  %9076 = vxpose.xlu0.b32.cont [15/16] %v8393, 128
  %9077 = vxpose.xlu0.b32.end [16/16] %v8409, 128
  %v9078 = vpop.trf.xlu0
  %v9079 = vpop.trf.xlu0
  %v9080 = vpop.trf.xlu0
  %v9081 = vpop.trf.xlu0
  %v9082 = vpop.trf.xlu0
  %v9083 = vpop.trf.xlu0
  %v9084 = vpop.trf.xlu0
  %v9085 = vpop.trf.xlu0
  %v9086 = vpop.trf.xlu0
  %v9087 = vpop.trf.xlu0
  %v9088 = vpop.trf.xlu0
  %v9089 = vpop.trf.xlu0
  %v9090 = vpop.trf.xlu0
  %v9091 = vpop.trf.xlu0
  %v9092 = vpop.trf.xlu0
  %v9093 = vpop.trf.xlu0
  %9094 = vxpose.xlu0.b32.start [1/16] %v8170, 128
  %9095 = vxpose.xlu0.b32.cont [2/16] %v8186, 128
  %9096 = vxpose.xlu0.b32.cont [3/16] %v8202, 128
  %9097 = vxpose.xlu0.b32.cont [4/16] %v8218, 128
  %9098 = vxpose.xlu0.b32.cont [5/16] %v8234, 128
  %9099 = vxpose.xlu0.b32.cont [6/16] %v8250, 128
  %9100 = vxpose.xlu0.b32.cont [7/16] %v8266, 128
  %9101 = vxpose.xlu0.b32.cont [8/16] %v8282, 128
  %9102 = vxpose.xlu0.b32.cont [9/16] %v8298, 128
  %9103 = vxpose.xlu0.b32.cont [10/16] %v8314, 128
  %9104 = vxpose.xlu0.b32.cont [11/16] %v8330, 128
  %9105 = vxpose.xlu0.b32.cont [12/16] %v8346, 128
  %9106 = vxpose.xlu0.b32.cont [13/16] %v8362, 128
  %9107 = vxpose.xlu0.b32.cont [14/16] %v8378, 128
  %9108 = vxpose.xlu0.b32.cont [15/16] %v8394, 128
  %9109 = vxpose.xlu0.b32.end [16/16] %v8410, 128
  %v9110 = vpop.trf.xlu0
  %v9111 = vpop.trf.xlu0
  %v9112 = vpop.trf.xlu0
  %v9113 = vpop.trf.xlu0
  %v9114 = vpop.trf.xlu0
  %v9115 = vpop.trf.xlu0
  %v9116 = vpop.trf.xlu0
  %v9117 = vpop.trf.xlu0
  %v9118 = vpop.trf.xlu0
  %v9119 = vpop.trf.xlu0
  %v9120 = vpop.trf.xlu0
  %v9121 = vpop.trf.xlu0
  %v9122 = vpop.trf.xlu0
  %v9123 = vpop.trf.xlu0
  %v9124 = vpop.trf.xlu0
  %v9125 = vpop.trf.xlu0
  %9126 = vxpose.xlu0.b32.start [1/16] %v8171, 128
  %9127 = vxpose.xlu0.b32.cont [2/16] %v8187, 128
  %9128 = vxpose.xlu0.b32.cont [3/16] %v8203, 128
  %9129 = vxpose.xlu0.b32.cont [4/16] %v8219, 128
  %9130 = vxpose.xlu0.b32.cont [5/16] %v8235, 128
  %9131 = vxpose.xlu0.b32.cont [6/16] %v8251, 128
  %9132 = vxpose.xlu0.b32.cont [7/16] %v8267, 128
  %9133 = vxpose.xlu0.b32.cont [8/16] %v8283, 128
  %9134 = vxpose.xlu0.b32.cont [9/16] %v8299, 128
  %9135 = vxpose.xlu0.b32.cont [10/16] %v8315, 128
  %9136 = vxpose.xlu0.b32.cont [11/16] %v8331, 128
  %9137 = vxpose.xlu0.b32.cont [12/16] %v8347, 128
  %9138 = vxpose.xlu0.b32.cont [13/16] %v8363, 128
  %9139 = vxpose.xlu0.b32.cont [14/16] %v8379, 128
  %9140 = vxpose.xlu0.b32.cont [15/16] %v8395, 128
  %9141 = vxpose.xlu0.b32.end [16/16] %v8411, 128
  %v9142 = vpop.trf.xlu0
  %v9143 = vpop.trf.xlu0
  %v9144 = vpop.trf.xlu0
  %v9145 = vpop.trf.xlu0
  %v9146 = vpop.trf.xlu0
  %v9147 = vpop.trf.xlu0
  %v9148 = vpop.trf.xlu0
  %v9149 = vpop.trf.xlu0
  %v9150 = vpop.trf.xlu0
  %v9151 = vpop.trf.xlu0
  %v9152 = vpop.trf.xlu0
  %v9153 = vpop.trf.xlu0
  %v9154 = vpop.trf.xlu0
  %v9155 = vpop.trf.xlu0
  %v9156 = vpop.trf.xlu0
  %v9157 = vpop.trf.xlu0
  %9158 = vxpose.xlu0.b32.start [1/16] %v8172, 128
  %9159 = vxpose.xlu0.b32.cont [2/16] %v8188, 128
  %9160 = vxpose.xlu0.b32.cont [3/16] %v8204, 128
  %9161 = vxpose.xlu0.b32.cont [4/16] %v8220, 128
  %9162 = vxpose.xlu0.b32.cont [5/16] %v8236, 128
  %9163 = vxpose.xlu0.b32.cont [6/16] %v8252, 128
  %9164 = vxpose.xlu0.b32.cont [7/16] %v8268, 128
  %9165 = vxpose.xlu0.b32.cont [8/16] %v8284, 128
  %9166 = vxpose.xlu0.b32.cont [9/16] %v8300, 128
  %9167 = vxpose.xlu0.b32.cont [10/16] %v8316, 128
  %9168 = vxpose.xlu0.b32.cont [11/16] %v8332, 128
  %9169 = vxpose.xlu0.b32.cont [12/16] %v8348, 128
  %9170 = vxpose.xlu0.b32.cont [13/16] %v8364, 128
  %9171 = vxpose.xlu0.b32.cont [14/16] %v8380, 128
  %9172 = vxpose.xlu0.b32.cont [15/16] %v8396, 128
  %9173 = vxpose.xlu0.b32.end [16/16] %v8412, 128
  %v9174 = vpop.trf.xlu0
  %v9175 = vpop.trf.xlu0
  %v9176 = vpop.trf.xlu0
  %v9177 = vpop.trf.xlu0
  %v9178 = vpop.trf.xlu0
  %v9179 = vpop.trf.xlu0
  %v9180 = vpop.trf.xlu0
  %v9181 = vpop.trf.xlu0
  %v9182 = vpop.trf.xlu0
  %v9183 = vpop.trf.xlu0
  %v9184 = vpop.trf.xlu0
  %v9185 = vpop.trf.xlu0
  %v9186 = vpop.trf.xlu0
  %v9187 = vpop.trf.xlu0
  %v9188 = vpop.trf.xlu0
  %v9189 = vpop.trf.xlu0
  %9190 = vxpose.xlu0.b32.start [1/16] %v8173, 128
  %9191 = vxpose.xlu0.b32.cont [2/16] %v8189, 128
  %9192 = vxpose.xlu0.b32.cont [3/16] %v8205, 128
  %9193 = vxpose.xlu0.b32.cont [4/16] %v8221, 128
  %9194 = vxpose.xlu0.b32.cont [5/16] %v8237, 128
  %9195 = vxpose.xlu0.b32.cont [6/16] %v8253, 128
  %9196 = vxpose.xlu0.b32.cont [7/16] %v8269, 128
  %9197 = vxpose.xlu0.b32.cont [8/16] %v8285, 128
  %9198 = vxpose.xlu0.b32.cont [9/16] %v8301, 128
  %9199 = vxpose.xlu0.b32.cont [10/16] %v8317, 128
  %9200 = vxpose.xlu0.b32.cont [11/16] %v8333, 128
  %9201 = vxpose.xlu0.b32.cont [12/16] %v8349, 128
  %9202 = vxpose.xlu0.b32.cont [13/16] %v8365, 128
  %9203 = vxpose.xlu0.b32.cont [14/16] %v8381, 128
  %9204 = vxpose.xlu0.b32.cont [15/16] %v8397, 128
  %9205 = vxpose.xlu0.b32.end [16/16] %v8413, 128
  %v9206 = vpop.trf.xlu0
  %v9207 = vpop.trf.xlu0
  %v9208 = vpop.trf.xlu0
  %v9209 = vpop.trf.xlu0
  %v9210 = vpop.trf.xlu0
  %v9211 = vpop.trf.xlu0
  %v9212 = vpop.trf.xlu0
  %v9213 = vpop.trf.xlu0
  %v9214 = vpop.trf.xlu0
  %v9215 = vpop.trf.xlu0
  %v9216 = vpop.trf.xlu0
  %v9217 = vpop.trf.xlu0
  %v9218 = vpop.trf.xlu0
  %v9219 = vpop.trf.xlu0
  %v9220 = vpop.trf.xlu0
  %v9221 = vpop.trf.xlu0
  %9222 = vxpose.xlu0.b32.start [1/16] %v8174, 128
  %9223 = vxpose.xlu0.b32.cont [2/16] %v8190, 128
  %9224 = vxpose.xlu0.b32.cont [3/16] %v8206, 128
  %9225 = vxpose.xlu0.b32.cont [4/16] %v8222, 128
  %9226 = vxpose.xlu0.b32.cont [5/16] %v8238, 128
  %9227 = vxpose.xlu0.b32.cont [6/16] %v8254, 128
  %9228 = vxpose.xlu0.b32.cont [7/16] %v8270, 128
  %9229 = vxpose.xlu0.b32.cont [8/16] %v8286, 128
  %9230 = vxpose.xlu0.b32.cont [9/16] %v8302, 128
  %9231 = vxpose.xlu0.b32.cont [10/16] %v8318, 128
  %9232 = vxpose.xlu0.b32.cont [11/16] %v8334, 128
  %9233 = vxpose.xlu0.b32.cont [12/16] %v8350, 128
  %9234 = vxpose.xlu0.b32.cont [13/16] %v8366, 128
  %9235 = vxpose.xlu0.b32.cont [14/16] %v8382, 128
  %9236 = vxpose.xlu0.b32.cont [15/16] %v8398, 128
  %9237 = vxpose.xlu0.b32.end [16/16] %v8414, 128
  %v9238 = vpop.trf.xlu0
  %v9239 = vpop.trf.xlu0
  %v9240 = vpop.trf.xlu0
  %v9241 = vpop.trf.xlu0
  %v9242 = vpop.trf.xlu0
  %v9243 = vpop.trf.xlu0
  %v9244 = vpop.trf.xlu0
  %v9245 = vpop.trf.xlu0
  %v9246 = vpop.trf.xlu0
  %v9247 = vpop.trf.xlu0
  %v9248 = vpop.trf.xlu0
  %v9249 = vpop.trf.xlu0
  %v9250 = vpop.trf.xlu0
  %v9251 = vpop.trf.xlu0
  %v9252 = vpop.trf.xlu0
  %v9253 = vpop.trf.xlu0
  %9254 = vxpose.xlu0.b32.start [1/16] %v8175, 128
  %9255 = vxpose.xlu0.b32.cont [2/16] %v8191, 128
  %9256 = vxpose.xlu0.b32.cont [3/16] %v8207, 128
  %9257 = vxpose.xlu0.b32.cont [4/16] %v8223, 128
  %9258 = vxpose.xlu0.b32.cont [5/16] %v8239, 128
  %9259 = vxpose.xlu0.b32.cont [6/16] %v8255, 128
  %9260 = vxpose.xlu0.b32.cont [7/16] %v8271, 128
  %9261 = vxpose.xlu0.b32.cont [8/16] %v8287, 128
  %9262 = vxpose.xlu0.b32.cont [9/16] %v8303, 128
  %9263 = vxpose.xlu0.b32.cont [10/16] %v8319, 128
  %9264 = vxpose.xlu0.b32.cont [11/16] %v8335, 128
  %9265 = vxpose.xlu0.b32.cont [12/16] %v8351, 128
  %9266 = vxpose.xlu0.b32.cont [13/16] %v8367, 128
  %9267 = vxpose.xlu0.b32.cont [14/16] %v8383, 128
  %9268 = vxpose.xlu0.b32.cont [15/16] %v8399, 128
  %9269 = vxpose.xlu0.b32.end [16/16] %v8415, 128
  %v9270 = vpop.trf.xlu0
  %v9271 = vpop.trf.xlu0
  %v9272 = vpop.trf.xlu0
  %v9273 = vpop.trf.xlu0
  %v9274 = vpop.trf.xlu0
  %v9275 = vpop.trf.xlu0
  %v9276 = vpop.trf.xlu0
  %v9277 = vpop.trf.xlu0
  %v9278 = vpop.trf.xlu0
  %v9279 = vpop.trf.xlu0
  %v9280 = vpop.trf.xlu0
  %v9281 = vpop.trf.xlu0
  %v9282 = vpop.trf.xlu0
  %v9283 = vpop.trf.xlu0
  %v9284 = vpop.trf.xlu0
  %v9285 = vpop.trf.xlu0
  %9286 = vxpose.xlu0.b32.start [1/16] %v8176, 128
  %9287 = vxpose.xlu0.b32.cont [2/16] %v8192, 128
  %9288 = vxpose.xlu0.b32.cont [3/16] %v8208, 128
  %9289 = vxpose.xlu0.b32.cont [4/16] %v8224, 128
  %9290 = vxpose.xlu0.b32.cont [5/16] %v8240, 128
  %9291 = vxpose.xlu0.b32.cont [6/16] %v8256, 128
  %9292 = vxpose.xlu0.b32.cont [7/16] %v8272, 128
  %9293 = vxpose.xlu0.b32.cont [8/16] %v8288, 128
  %9294 = vxpose.xlu0.b32.cont [9/16] %v8304, 128
  %9295 = vxpose.xlu0.b32.cont [10/16] %v8320, 128
  %9296 = vxpose.xlu0.b32.cont [11/16] %v8336, 128
  %9297 = vxpose.xlu0.b32.cont [12/16] %v8352, 128
  %9298 = vxpose.xlu0.b32.cont [13/16] %v8368, 128
  %9299 = vxpose.xlu0.b32.cont [14/16] %v8384, 128
  %9300 = vxpose.xlu0.b32.cont [15/16] %v8400, 128
  %9301 = vxpose.xlu0.b32.end [16/16] %v8416, 128
  %v9302 = vpop.trf.xlu0
  %v9303 = vpop.trf.xlu0
  %v9304 = vpop.trf.xlu0
  %v9305 = vpop.trf.xlu0
  %v9306 = vpop.trf.xlu0
  %v9307 = vpop.trf.xlu0
  %v9308 = vpop.trf.xlu0
  %v9309 = vpop.trf.xlu0
  %v9310 = vpop.trf.xlu0
  %v9311 = vpop.trf.xlu0
  %v9312 = vpop.trf.xlu0
  %v9313 = vpop.trf.xlu0
  %v9314 = vpop.trf.xlu0
  %v9315 = vpop.trf.xlu0
  %v9316 = vpop.trf.xlu0
  %v9317 = vpop.trf.xlu0
  %9318 = vxpose.xlu0.b32.start [1/16] %v8177, 128
  %9319 = vxpose.xlu0.b32.cont [2/16] %v8193, 128
  %9320 = vxpose.xlu0.b32.cont [3/16] %v8209, 128
  %9321 = vxpose.xlu0.b32.cont [4/16] %v8225, 128
  %9322 = vxpose.xlu0.b32.cont [5/16] %v8241, 128
  %9323 = vxpose.xlu0.b32.cont [6/16] %v8257, 128
  %9324 = vxpose.xlu0.b32.cont [7/16] %v8273, 128
  %9325 = vxpose.xlu0.b32.cont [8/16] %v8289, 128
  %9326 = vxpose.xlu0.b32.cont [9/16] %v8305, 128
  %9327 = vxpose.xlu0.b32.cont [10/16] %v8321, 128
  %9328 = vxpose.xlu0.b32.cont [11/16] %v8337, 128
  %9329 = vxpose.xlu0.b32.cont [12/16] %v8353, 128
  %9330 = vxpose.xlu0.b32.cont [13/16] %v8369, 128
  %9331 = vxpose.xlu0.b32.cont [14/16] %v8385, 128
  %9332 = vxpose.xlu0.b32.cont [15/16] %v8401, 128
  %9333 = vxpose.xlu0.b32.end [16/16] %v8417, 128
  %v9334 = vpop.trf.xlu0
  %v9335 = vpop.trf.xlu0
  %v9336 = vpop.trf.xlu0
  %v9337 = vpop.trf.xlu0
  %v9338 = vpop.trf.xlu0
  %v9339 = vpop.trf.xlu0
  %v9340 = vpop.trf.xlu0
  %v9341 = vpop.trf.xlu0
  %v9342 = vpop.trf.xlu0
  %v9343 = vpop.trf.xlu0
  %v9344 = vpop.trf.xlu0
  %v9345 = vpop.trf.xlu0
  %v9346 = vpop.trf.xlu0
  %v9347 = vpop.trf.xlu0
  %v9348 = vpop.trf.xlu0
  %v9349 = vpop.trf.xlu0
  %9350 = vxpose.xlu0.b32.start [1/16] %v8178, 128
  %9351 = vxpose.xlu0.b32.cont [2/16] %v8194, 128
  %9352 = vxpose.xlu0.b32.cont [3/16] %v8210, 128
  %9353 = vxpose.xlu0.b32.cont [4/16] %v8226, 128
  %9354 = vxpose.xlu0.b32.cont [5/16] %v8242, 128
  %9355 = vxpose.xlu0.b32.cont [6/16] %v8258, 128
  %9356 = vxpose.xlu0.b32.cont [7/16] %v8274, 128
  %9357 = vxpose.xlu0.b32.cont [8/16] %v8290, 128
  %9358 = vxpose.xlu0.b32.cont [9/16] %v8306, 128
  %9359 = vxpose.xlu0.b32.cont [10/16] %v8322, 128
  %9360 = vxpose.xlu0.b32.cont [11/16] %v8338, 128
  %9361 = vxpose.xlu0.b32.cont [12/16] %v8354, 128
  %9362 = vxpose.xlu0.b32.cont [13/16] %v8370, 128
  %9363 = vxpose.xlu0.b32.cont [14/16] %v8386, 128
  %9364 = vxpose.xlu0.b32.cont [15/16] %v8402, 128
  %9365 = vxpose.xlu0.b32.end [16/16] %v8418, 128
  %v9366 = vpop.trf.xlu0
  %v9367 = vpop.trf.xlu0
  %v9368 = vpop.trf.xlu0
  %v9369 = vpop.trf.xlu0
  %v9370 = vpop.trf.xlu0
  %v9371 = vpop.trf.xlu0
  %v9372 = vpop.trf.xlu0
  %v9373 = vpop.trf.xlu0
  %v9374 = vpop.trf.xlu0
  %v9375 = vpop.trf.xlu0
  %v9376 = vpop.trf.xlu0
  %v9377 = vpop.trf.xlu0
  %v9378 = vpop.trf.xlu0
  %v9379 = vpop.trf.xlu0
  %v9380 = vpop.trf.xlu0
  %v9381 = vpop.trf.xlu0
  %9382 = vxpose.xlu0.b32.start [1/16] %v8179, 128
  %9383 = vxpose.xlu0.b32.cont [2/16] %v8195, 128
  %9384 = vxpose.xlu0.b32.cont [3/16] %v8211, 128
  %9385 = vxpose.xlu0.b32.cont [4/16] %v8227, 128
  %9386 = vxpose.xlu0.b32.cont [5/16] %v8243, 128
  %9387 = vxpose.xlu0.b32.cont [6/16] %v8259, 128
  %9388 = vxpose.xlu0.b32.cont [7/16] %v8275, 128
  %9389 = vxpose.xlu0.b32.cont [8/16] %v8291, 128
  %9390 = vxpose.xlu0.b32.cont [9/16] %v8307, 128
  %9391 = vxpose.xlu0.b32.cont [10/16] %v8323, 128
  %9392 = vxpose.xlu0.b32.cont [11/16] %v8339, 128
  %9393 = vxpose.xlu0.b32.cont [12/16] %v8355, 128
  %9394 = vxpose.xlu0.b32.cont [13/16] %v8371, 128
  %9395 = vxpose.xlu0.b32.cont [14/16] %v8387, 128
  %9396 = vxpose.xlu0.b32.cont [15/16] %v8403, 128
  %9397 = vxpose.xlu0.b32.end [16/16] %v8419, 128
  %v9398 = vpop.trf.xlu0
  %v9399 = vpop.trf.xlu0
  %v9400 = vpop.trf.xlu0
  %v9401 = vpop.trf.xlu0
  %v9402 = vpop.trf.xlu0
  %v9403 = vpop.trf.xlu0
  %v9404 = vpop.trf.xlu0
  %v9405 = vpop.trf.xlu0
  %v9406 = vpop.trf.xlu0
  %v9407 = vpop.trf.xlu0
  %v9408 = vpop.trf.xlu0
  %v9409 = vpop.trf.xlu0
  %v9410 = vpop.trf.xlu0
  %v9411 = vpop.trf.xlu0
  %v9412 = vpop.trf.xlu0
  %v9413 = vpop.trf.xlu0
  %9414 = vxpose.xlu0.b32.start [1/16] %v8180, 128
  %9415 = vxpose.xlu0.b32.cont [2/16] %v8196, 128
  %9416 = vxpose.xlu0.b32.cont [3/16] %v8212, 128
  %9417 = vxpose.xlu0.b32.cont [4/16] %v8228, 128
  %9418 = vxpose.xlu0.b32.cont [5/16] %v8244, 128
  %9419 = vxpose.xlu0.b32.cont [6/16] %v8260, 128
  %9420 = vxpose.xlu0.b32.cont [7/16] %v8276, 128
  %9421 = vxpose.xlu0.b32.cont [8/16] %v8292, 128
  %9422 = vxpose.xlu0.b32.cont [9/16] %v8308, 128
  %9423 = vxpose.xlu0.b32.cont [10/16] %v8324, 128
  %9424 = vxpose.xlu0.b32.cont [11/16] %v8340, 128
  %9425 = vxpose.xlu0.b32.cont [12/16] %v8356, 128
  %9426 = vxpose.xlu0.b32.cont [13/16] %v8372, 128
  %9427 = vxpose.xlu0.b32.cont [14/16] %v8388, 128
  %9428 = vxpose.xlu0.b32.cont [15/16] %v8404, 128
  %9429 = vxpose.xlu0.b32.end [16/16] %v8420, 128
  %v9430 = vpop.trf.xlu0
  %v9431 = vpop.trf.xlu0
  %v9432 = vpop.trf.xlu0
  %v9433 = vpop.trf.xlu0
  %v9434 = vpop.trf.xlu0
  %v9435 = vpop.trf.xlu0
  %v9436 = vpop.trf.xlu0
  %v9437 = vpop.trf.xlu0
  %v9438 = vpop.trf.xlu0
  %v9439 = vpop.trf.xlu0
  %v9440 = vpop.trf.xlu0
  %v9441 = vpop.trf.xlu0
  %v9442 = vpop.trf.xlu0
  %v9443 = vpop.trf.xlu0
  %v9444 = vpop.trf.xlu0
  %v9445 = vpop.trf.xlu0
  %9446 = vxpose.xlu0.b32.start [1/16] %v8181, 128
  %9447 = vxpose.xlu0.b32.cont [2/16] %v8197, 128
  %9448 = vxpose.xlu0.b32.cont [3/16] %v8213, 128
  %9449 = vxpose.xlu0.b32.cont [4/16] %v8229, 128
  %9450 = vxpose.xlu0.b32.cont [5/16] %v8245, 128
  %9451 = vxpose.xlu0.b32.cont [6/16] %v8261, 128
  %9452 = vxpose.xlu0.b32.cont [7/16] %v8277, 128
  %9453 = vxpose.xlu0.b32.cont [8/16] %v8293, 128
  %9454 = vxpose.xlu0.b32.cont [9/16] %v8309, 128
  %9455 = vxpose.xlu0.b32.cont [10/16] %v8325, 128
  %9456 = vxpose.xlu0.b32.cont [11/16] %v8341, 128
  %9457 = vxpose.xlu0.b32.cont [12/16] %v8357, 128
  %9458 = vxpose.xlu0.b32.cont [13/16] %v8373, 128
  %9459 = vxpose.xlu0.b32.cont [14/16] %v8389, 128
  %9460 = vxpose.xlu0.b32.cont [15/16] %v8405, 128
  %9461 = vxpose.xlu0.b32.end [16/16] %v8421, 128
  %v9462 = vpop.trf.xlu0
  %v9463 = vpop.trf.xlu0
  %v9464 = vpop.trf.xlu0
  %v9465 = vpop.trf.xlu0
  %v9466 = vpop.trf.xlu0
  %v9467 = vpop.trf.xlu0
  %v9468 = vpop.trf.xlu0
  %v9469 = vpop.trf.xlu0
  %v9470 = vpop.trf.xlu0
  %v9471 = vpop.trf.xlu0
  %v9472 = vpop.trf.xlu0
  %v9473 = vpop.trf.xlu0
  %v9474 = vpop.trf.xlu0
  %v9475 = vpop.trf.xlu0
  %v9476 = vpop.trf.xlu0
  %v9477 = vpop.trf.xlu0
  %9478 = vmatprep.subr.mxu0 0.0
  %9479 = vmatpush1.msra.mxu0 %v8422
  %9480 = vmatprep.subr.mxu0 0.0
  %9481 = vmatpush1.msra.mxu0 %v8423
  %9482 = vmatprep.subr.mxu0 0.0
  %9483 = vmatpush1.msra.mxu0 %v8424
  %9484 = vmatprep.subr.mxu0 0.0
  %9485 = vmatpush1.msra.mxu0 %v8425
  %9486 = vmatprep.subr.mxu0 0.0
  %9487 = vmatpush1.msra.mxu0 %v8426
  %9488 = vmatprep.subr.mxu0 0.0
  %9489 = vmatpush1.msra.mxu0 %v8427
  %9490 = vmatprep.subr.mxu0 0.0
  %9491 = vmatpush1.msra.mxu0 %v8428
  %9492 = vmatprep.subr.mxu0 0.0
  %9493 = vmatpush1.msra.mxu0 %v8429
  %9494 = vmatprep.subr.mxu0 0.0
  %9495 = vmatpush1.msra.mxu0 %v8430
  %9496 = vmatprep.subr.mxu0 0.0
  %9497 = vmatpush1.msra.mxu0 %v8431
  %9498 = vmatprep.subr.mxu0 0.0
  %9499 = vmatpush1.msra.mxu0 %v8432
  %9500 = vmatprep.subr.mxu0 0.0
  %9501 = vmatpush1.msra.mxu0 %v8433
  %9502 = vmatprep.subr.mxu0 0.0
  %9503 = vmatpush1.msra.mxu0 %v8434
  %9504 = vmatprep.subr.mxu0 0.0
  %9505 = vmatpush1.msra.mxu0 %v8435
  %9506 = vmatprep.subr.mxu0 0.0
  %9507 = vmatpush1.msra.mxu0 %v8436
  %9508 = vmatprep.subr.mxu0 0.0
  %9509 = vmatpush1.msra.mxu0 %v8437
  %9510 = vmatprep.subr.mxu0 0.0
  %9511 = vmatpush1.msra.mxu0 %v8438
  %9512 = vmatprep.subr.mxu0 0.0
  %9513 = vmatpush1.msra.mxu0 %v8439
  %9514 = vmatprep.subr.mxu0 0.0
  %9515 = vmatpush1.msra.mxu0 %v8440
  %9516 = vmatprep.subr.mxu0 0.0
  %9517 = vmatpush1.msra.mxu0 %v8441
  %9518 = vmatprep.subr.mxu0 0.0
  %9519 = vmatpush1.msra.mxu0 %v8442
  %9520 = vmatprep.subr.mxu0 0.0
  %9521 = vmatpush1.msra.mxu0 %v8443
  %9522 = vmatprep.subr.mxu0 0.0
  %9523 = vmatpush1.msra.mxu0 %v8444
  %9524 = vmatprep.subr.mxu0 0.0
  %9525 = vmatpush1.msra.mxu0 %v8445
  %9526 = vmatprep.subr.mxu0 0.0
  %9527 = vmatpush1.msra.mxu0 %v8446
  %9528 = vmatprep.subr.mxu0 0.0
  %9529 = vmatpush1.msra.mxu0 %v8447
  %9530 = vmatprep.subr.mxu0 0.0
  %9531 = vmatpush1.msra.mxu0 %v8448
  %9532 = vmatprep.subr.mxu0 0.0
  %9533 = vmatpush1.msra.mxu0 %v8449
  %9534 = vmatprep.subr.mxu0 0.0
  %9535 = vmatpush1.msra.mxu0 %v8450
  %9536 = vmatprep.subr.mxu0 0.0
  %9537 = vmatpush1.msra.mxu0 %v8451
  %9538 = vmatprep.subr.mxu0 0.0
  %9539 = vmatpush1.msra.mxu0 %v8452
  %9540 = vmatprep.subr.mxu0 0.0
  %9541 = vmatpush1.msra.mxu0 %v8453
  %9542 = vmatprep.mubr.f32.mxu0 %v8982
  %9543 = vmatmul.mubr.f32.gmra.mrb[0].mxu0 %v8470
  %v9544 = vpop.f32.mrb[0].mxu0
  %v9545 = vadd.f32 0.0, %v9544
  %v9546 = vpop.f32.mrb[0].mxu0
  %9547 = vmatprep.mubr.f32.mxu0 %v8983
  %9548 = vmatmul.mubr.f32.gmra.mrb[0].mxu0 %v8471
  %v9549 = vpop.f32.mrb[0].mxu0
  %v9550 = vadd.f32 0.0, %v9549
  %v9551 = vpop.f32.mrb[0].mxu0
  %9552 = vmatprep.mubr.f32.mxu0 %v8984
  %9553 = vmatmul.mubr.f32.gmra.mrb[0].mxu0 %v8472
  %v9554 = vpop.f32.mrb[0].mxu0
  %v9555 = vadd.f32 0.0, %v9554
  %v9556 = vpop.f32.mrb[0].mxu0
  %9557 = vmatprep.mubr.f32.mxu0 %v8985
  %9558 = vmatmul.mubr.f32.gmra.mrb[0].mxu0 %v8473
  %v9559 = vpop.f32.mrb[0].mxu0
  %v9560 = vadd.f32 0.0, %v9559
  %v9561 = vpop.f32.mrb[0].mxu0
  %9562 = vmatprep.mubr.f32.mxu0 %v8986
  %9563 = vmatmul.mubr.f32.gmra.mrb[0].mxu0 %v8474
  %v9564 = vpop.f32.mrb[0].mxu0
  %v9565 = vadd.f32 0.0, %v9564
  %v9566 = vpop.f32.mrb[0].mxu0
  %9567 = vmatprep.mubr.f32.mxu0 %v8987
  %9568 = vmatmul.mubr.f32.gmra.mrb[0].mxu0 %v8475
  %v9569 = vpop.f32.mrb[0].mxu0
  %v9570 = vadd.f32 0.0, %v9569
  %v9571 = vpop.f32.mrb[0].mxu0
  %9572 = vmatprep.mubr.f32.mxu0 %v8988
  %9573 = vmatmul.mubr.f32.gmra.mrb[0].mxu0 %v8476
  %v9574 = vpop.f32.mrb[0].mxu0
  %v9575 = vadd.f32 0.0, %v9574
  %v9576 = vpop.f32.mrb[0].mxu0
  %9577 = vmatprep.mubr.f32.mxu0 %v8989
  %9578 = vmatmul.mubr.f32.gmra.mrb[0].mxu0 %v8477
  %v9579 = vpop.f32.mrb[0].mxu0
  %v9580 = vadd.f32 0.0, %v9579
  %v9581 = vpop.f32.mrb[0].mxu0
  %9582 = vmatprep.mubr.f32.mxu0 %v8990
  %9583 = vmatmul.mubr.f32.gmra.mrb[0].mxu0 %v8478
  %v9584 = vpop.f32.mrb[0].mxu0
  %v9585 = vadd.f32 0.0, %v9584
  %v9586 = vpop.f32.mrb[0].mxu0
  %9587 = vmatprep.mubr.f32.mxu0 %v8991
  %9588 = vmatmul.mubr.f32.gmra.mrb[0].mxu0 %v8479
  %v9589 = vpop.f32.mrb[0].mxu0
  %v9590 = vadd.f32 0.0, %v9589
  %v9591 = vpop.f32.mrb[0].mxu0
  %9592 = vmatprep.mubr.f32.mxu0 %v8992
  %9593 = vmatmul.mubr.f32.gmra.mrb[0].mxu0 %v8480
  %v9594 = vpop.f32.mrb[0].mxu0
  %v9595 = vadd.f32 0.0, %v9594
  %v9596 = vpop.f32.mrb[0].mxu0
  %9597 = vmatprep.mubr.f32.mxu0 %v8993
  %9598 = vmatmul.mubr.f32.gmra.mrb[0].mxu0 %v8481
  %v9599 = vpop.f32.mrb[0].mxu0
  %v9600 = vadd.f32 0.0, %v9599
  %v9601 = vpop.f32.mrb[0].mxu0
  %9602 = vmatprep.mubr.f32.mxu0 %v8994
  %9603 = vmatmul.mubr.f32.gmra.mrb[0].mxu0 %v8482
  %v9604 = vpop.f32.mrb[0].mxu0
  %v9605 = vadd.f32 0.0, %v9604
  %v9606 = vpop.f32.mrb[0].mxu0
  %9607 = vmatprep.mubr.f32.mxu0 %v8995
  %9608 = vmatmul.mubr.f32.gmra.mrb[0].mxu0 %v8483
  %v9609 = vpop.f32.mrb[0].mxu0
  %v9610 = vadd.f32 0.0, %v9609
  %v9611 = vpop.f32.mrb[0].mxu0
  %9612 = vmatprep.mubr.f32.mxu0 %v8996
  %9613 = vmatmul.mubr.f32.gmra.mrb[0].mxu0 %v8484
  %v9614 = vpop.f32.mrb[0].mxu0
  %v9615 = vadd.f32 0.0, %v9614
  %v9616 = vpop.f32.mrb[0].mxu0
  %9617 = vmatprep.mubr.f32.mxu0 %v8997
  %9618 = vmatmul.mubr.f32.gmra.mrb[0].mxu0 %v8485
  %v9619 = vpop.f32.mrb[0].mxu0
  %v9620 = vadd.f32 0.0, %v9619
  %v9621 = vpop.f32.mrb[0].mxu0
  %9622 = vmatprep.mubr.f32.mxu0 %v9014
  %9623 = vmatmul.mubr.f32.gmra.mrb[0].mxu0 %v8502
  %v9624 = vpop.f32.mrb[0].mxu0
  %v9625 = vadd.f32 0.0, %v9624
  %v9626 = vpop.f32.mrb[0].mxu0
  %9627 = vmatprep.mubr.f32.mxu0 %v9015
  %9628 = vmatmul.mubr.f32.gmra.mrb[0].mxu0 %v8503
  %v9629 = vpop.f32.mrb[0].mxu0
  %v9630 = vadd.f32 0.0, %v9629
  %v9631 = vpop.f32.mrb[0].mxu0
  %9632 = vmatprep.mubr.f32.mxu0 %v9016
  %9633 = vmatmul.mubr.f32.gmra.mrb[0].mxu0 %v8504
  %v9634 = vpop.f32.mrb[0].mxu0
  %v9635 = vadd.f32 0.0, %v9634
  %v9636 = vpop.f32.mrb[0].mxu0
  %9637 = vmatprep.mubr.f32.mxu0 %v9017
  %9638 = vmatmul.mubr.f32.gmra.mrb[0].mxu0 %v8505
  %v9639 = vpop.f32.mrb[0].mxu0
  %v9640 = vadd.f32 0.0, %v9639
  %v9641 = vpop.f32.mrb[0].mxu0
  %9642 = vmatprep.mubr.f32.mxu0 %v9018
  %9643 = vmatmul.mubr.f32.gmra.mrb[0].mxu0 %v8506
  %v9644 = vpop.f32.mrb[0].mxu0
  %v9645 = vadd.f32 0.0, %v9644
  %v9646 = vpop.f32.mrb[0].mxu0
  %9647 = vmatprep.mubr.f32.mxu0 %v9019
  %9648 = vmatmul.mubr.f32.gmra.mrb[0].mxu0 %v8507
  %v9649 = vpop.f32.mrb[0].mxu0
  %v9650 = vadd.f32 0.0, %v9649
  %v9651 = vpop.f32.mrb[0].mxu0
  %9652 = vmatprep.mubr.f32.mxu0 %v9020
  %9653 = vmatmul.mubr.f32.gmra.mrb[0].mxu0 %v8508
  %v9654 = vpop.f32.mrb[0].mxu0
  %v9655 = vadd.f32 0.0, %v9654
  %v9656 = vpop.f32.mrb[0].mxu0
  %9657 = vmatprep.mubr.f32.mxu0 %v9021
  %9658 = vmatmul.mubr.f32.gmra.mrb[0].mxu0 %v8509
  %v9659 = vpop.f32.mrb[0].mxu0
  %v9660 = vadd.f32 0.0, %v9659
  %v9661 = vpop.f32.mrb[0].mxu0
  %9662 = vmatprep.mubr.f32.mxu0 %v9022
  %9663 = vmatmul.mubr.f32.gmra.mrb[0].mxu0 %v8510
  %v9664 = vpop.f32.mrb[0].mxu0
  %v9665 = vadd.f32 0.0, %v9664
  %v9666 = vpop.f32.mrb[0].mxu0
  %9667 = vmatprep.mubr.f32.mxu0 %v9023
  %9668 = vmatmul.mubr.f32.gmra.mrb[0].mxu0 %v8511
  %v9669 = vpop.f32.mrb[0].mxu0
  %v9670 = vadd.f32 0.0, %v9669
  %v9671 = vpop.f32.mrb[0].mxu0
  %9672 = vmatprep.mubr.f32.mxu0 %v9024
  %9673 = vmatmul.mubr.f32.gmra.mrb[0].mxu0 %v8512
  %v9674 = vpop.f32.mrb[0].mxu0
  %v9675 = vadd.f32 0.0, %v9674
  %v9676 = vpop.f32.mrb[0].mxu0
  %9677 = vmatprep.mubr.f32.mxu0 %v9025
  %9678 = vmatmul.mubr.f32.gmra.mrb[0].mxu0 %v8513
  %v9679 = vpop.f32.mrb[0].mxu0
  %v9680 = vadd.f32 0.0, %v9679
  %v9681 = vpop.f32.mrb[0].mxu0
  %9682 = vmatprep.mubr.f32.mxu0 %v9026
  %9683 = vmatmul.mubr.f32.gmra.mrb[0].mxu0 %v8514
  %v9684 = vpop.f32.mrb[0].mxu0
  %v9685 = vadd.f32 0.0, %v9684
  %v9686 = vpop.f32.mrb[0].mxu0
  %9687 = vmatprep.mubr.f32.mxu0 %v9027
  %9688 = vmatmul.mubr.f32.gmra.mrb[0].mxu0 %v8515
  %v9689 = vpop.f32.mrb[0].mxu0
  %v9690 = vadd.f32 0.0, %v9689
  %v9691 = vpop.f32.mrb[0].mxu0
  %9692 = vmatprep.mubr.f32.mxu0 %v9028
  %9693 = vmatmul.mubr.f32.gmra.mrb[0].mxu0 %v8516
  %v9694 = vpop.f32.mrb[0].mxu0
  %v9695 = vadd.f32 0.0, %v9694
  %v9696 = vpop.f32.mrb[0].mxu0
  %9697 = vmatprep.mubr.f32.mxu0 %v9029
  %9698 = vmatmul.mubr.f32.gmra.mrb[0].mxu0 %v8517
  %v9699 = vpop.f32.mrb[0].mxu0
  %v9700 = vadd.f32 0.0, %v9699
  %v9701 = vpop.f32.mrb[0].mxu0
  %9702 = vmatprep.mubr.f32.mxu0 %v9046
  %9703 = vmatmul.mubr.f32.gmra.mrb[0].mxu0 %v8534
  %v9704 = vpop.f32.mrb[0].mxu0
  %v9705 = vadd.f32 0.0, %v9704
  %v9706 = vpop.f32.mrb[0].mxu0
  %9707 = vmatprep.mubr.f32.mxu0 %v9047
  %9708 = vmatmul.mubr.f32.gmra.mrb[0].mxu0 %v8535
  %v9709 = vpop.f32.mrb[0].mxu0
  %v9710 = vadd.f32 0.0, %v9709
  %v9711 = vpop.f32.mrb[0].mxu0
  %9712 = vmatprep.mubr.f32.mxu0 %v9048
  %9713 = vmatmul.mubr.f32.gmra.mrb[0].mxu0 %v8536
  %v9714 = vpop.f32.mrb[0].mxu0
  %v9715 = vadd.f32 0.0, %v9714
  %v9716 = vpop.f32.mrb[0].mxu0
  %9717 = vmatprep.mubr.f32.mxu0 %v9049
  %9718 = vmatmul.mubr.f32.gmra.mrb[0].mxu0 %v8537
  %v9719 = vpop.f32.mrb[0].mxu0
  %v9720 = vadd.f32 0.0, %v9719
  %v9721 = vpop.f32.mrb[0].mxu0
  %9722 = vmatprep.mubr.f32.mxu0 %v9050
  %9723 = vmatmul.mubr.f32.gmra.mrb[0].mxu0 %v8538
  %v9724 = vpop.f32.mrb[0].mxu0
  %v9725 = vadd.f32 0.0, %v9724
  %v9726 = vpop.f32.mrb[0].mxu0
  %9727 = vmatprep.mubr.f32.mxu0 %v9051
  %9728 = vmatmul.mubr.f32.gmra.mrb[0].mxu0 %v8539
  %v9729 = vpop.f32.mrb[0].mxu0
  %v9730 = vadd.f32 0.0, %v9729
  %v9731 = vpop.f32.mrb[0].mxu0
  %9732 = vmatprep.mubr.f32.mxu0 %v9052
  %9733 = vmatmul.mubr.f32.gmra.mrb[0].mxu0 %v8540
  %v9734 = vpop.f32.mrb[0].mxu0
  %v9735 = vadd.f32 0.0, %v9734
  %v9736 = vpop.f32.mrb[0].mxu0
  %9737 = vmatprep.mubr.f32.mxu0 %v9053
  %9738 = vmatmul.mubr.f32.gmra.mrb[0].mxu0 %v8541
  %v9739 = vpop.f32.mrb[0].mxu0
  %v9740 = vadd.f32 0.0, %v9739
  %v9741 = vpop.f32.mrb[0].mxu0
  %9742 = vmatprep.mubr.f32.mxu0 %v9054
  %9743 = vmatmul.mubr.f32.gmra.mrb[0].mxu0 %v8542
  %v9744 = vpop.f32.mrb[0].mxu0
  %v9745 = vadd.f32 0.0, %v9744
  %v9746 = vpop.f32.mrb[0].mxu0
  %9747 = vmatprep.mubr.f32.mxu0 %v9055
  %9748 = vmatmul.mubr.f32.gmra.mrb[0].mxu0 %v8543
  %v9749 = vpop.f32.mrb[0].mxu0
  %v9750 = vadd.f32 0.0, %v9749
  %v9751 = vpop.f32.mrb[0].mxu0
  %9752 = vmatprep.mubr.f32.mxu0 %v9056
  %9753 = vmatmul.mubr.f32.gmra.mrb[0].mxu0 %v8544
  %v9754 = vpop.f32.mrb[0].mxu0
  %v9755 = vadd.f32 0.0, %v9754
  %v9756 = vpop.f32.mrb[0].mxu0
  %9757 = vmatprep.mubr.f32.mxu0 %v9057
  %9758 = vmatmul.mubr.f32.gmra.mrb[0].mxu0 %v8545
  %v9759 = vpop.f32.mrb[0].mxu0
  %v9760 = vadd.f32 0.0, %v9759
  %v9761 = vpop.f32.mrb[0].mxu0
  %9762 = vmatprep.mubr.f32.mxu0 %v9058
  %9763 = vmatmul.mubr.f32.gmra.mrb[0].mxu0 %v8546
  %v9764 = vpop.f32.mrb[0].mxu0
  %v9765 = vadd.f32 0.0, %v9764
  %v9766 = vpop.f32.mrb[0].mxu0
  %9767 = vmatprep.mubr.f32.mxu0 %v9059
  %9768 = vmatmul.mubr.f32.gmra.mrb[0].mxu0 %v8547
  %v9769 = vpop.f32.mrb[0].mxu0
  %v9770 = vadd.f32 0.0, %v9769
  %v9771 = vpop.f32.mrb[0].mxu0
  %9772 = vmatprep.mubr.f32.mxu0 %v9060
  %9773 = vmatmul.mubr.f32.gmra.mrb[0].mxu0 %v8548
  %v9774 = vpop.f32.mrb[0].mxu0
  %v9775 = vadd.f32 0.0, %v9774
  %v9776 = vpop.f32.mrb[0].mxu0
  %9777 = vmatprep.mubr.f32.mxu0 %v9061
  %9778 = vmatmul.mubr.f32.gmra.mrb[0].mxu0 %v8549
  %v9779 = vpop.f32.mrb[0].mxu0
  %v9780 = vadd.f32 0.0, %v9779
  %v9781 = vpop.f32.mrb[0].mxu0
  %9782 = vmatprep.mubr.f32.mxu0 %v9078
  %9783 = vmatmul.mubr.f32.gmra.mrb[0].mxu0 %v8566
  %v9784 = vpop.f32.mrb[0].mxu0
  %v9785 = vadd.f32 0.0, %v9784
  %v9786 = vpop.f32.mrb[0].mxu0
  %9787 = vmatprep.mubr.f32.mxu0 %v9079
  %9788 = vmatmul.mubr.f32.gmra.mrb[0].mxu0 %v8567
  %v9789 = vpop.f32.mrb[0].mxu0
  %v9790 = vadd.f32 0.0, %v9789
  %v9791 = vpop.f32.mrb[0].mxu0
  %9792 = vmatprep.mubr.f32.mxu0 %v9080
  %9793 = vmatmul.mubr.f32.gmra.mrb[0].mxu0 %v8568
  %v9794 = vpop.f32.mrb[0].mxu0
  %v9795 = vadd.f32 0.0, %v9794
  %v9796 = vpop.f32.mrb[0].mxu0
  %9797 = vmatprep.mubr.f32.mxu0 %v9081
  %9798 = vmatmul.mubr.f32.gmra.mrb[0].mxu0 %v8569
  %v9799 = vpop.f32.mrb[0].mxu0
  %v9800 = vadd.f32 0.0, %v9799
  %v9801 = vpop.f32.mrb[0].mxu0
  %9802 = vmatprep.mubr.f32.mxu0 %v9082
  %9803 = vmatmul.mubr.f32.gmra.mrb[0].mxu0 %v8570
  %v9804 = vpop.f32.mrb[0].mxu0
  %v9805 = vadd.f32 0.0, %v9804
  %v9806 = vpop.f32.mrb[0].mxu0
  %9807 = vmatprep.mubr.f32.mxu0 %v9083
  %9808 = vmatmul.mubr.f32.gmra.mrb[0].mxu0 %v8571
  %v9809 = vpop.f32.mrb[0].mxu0
  %v9810 = vadd.f32 0.0, %v9809
  %v9811 = vpop.f32.mrb[0].mxu0
  %9812 = vmatprep.mubr.f32.mxu0 %v9084
  %9813 = vmatmul.mubr.f32.gmra.mrb[0].mxu0 %v8572
  %v9814 = vpop.f32.mrb[0].mxu0
  %v9815 = vadd.f32 0.0, %v9814
  %v9816 = vpop.f32.mrb[0].mxu0
  %9817 = vmatprep.mubr.f32.mxu0 %v9085
  %9818 = vmatmul.mubr.f32.gmra.mrb[0].mxu0 %v8573
  %v9819 = vpop.f32.mrb[0].mxu0
  %v9820 = vadd.f32 0.0, %v9819
  %v9821 = vpop.f32.mrb[0].mxu0
  %9822 = vmatprep.mubr.f32.mxu0 %v9086
  %9823 = vmatmul.mubr.f32.gmra.mrb[0].mxu0 %v8574
  %v9824 = vpop.f32.mrb[0].mxu0
  %v9825 = vadd.f32 0.0, %v9824
  %v9826 = vpop.f32.mrb[0].mxu0
  %9827 = vmatprep.mubr.f32.mxu0 %v9087
  %9828 = vmatmul.mubr.f32.gmra.mrb[0].mxu0 %v8575
  %v9829 = vpop.f32.mrb[0].mxu0
  %v9830 = vadd.f32 0.0, %v9829
  %v9831 = vpop.f32.mrb[0].mxu0
  %9832 = vmatprep.mubr.f32.mxu0 %v9088
  %9833 = vmatmul.mubr.f32.gmra.mrb[0].mxu0 %v8576
  %v9834 = vpop.f32.mrb[0].mxu0
  %v9835 = vadd.f32 0.0, %v9834
  %v9836 = vpop.f32.mrb[0].mxu0
  %9837 = vmatprep.mubr.f32.mxu0 %v9089
  %9838 = vmatmul.mubr.f32.gmra.mrb[0].mxu0 %v8577
  %v9839 = vpop.f32.mrb[0].mxu0
  %v9840 = vadd.f32 0.0, %v9839
  %v9841 = vpop.f32.mrb[0].mxu0
  %9842 = vmatprep.mubr.f32.mxu0 %v9090
  %9843 = vmatmul.mubr.f32.gmra.mrb[0].mxu0 %v8578
  %v9844 = vpop.f32.mrb[0].mxu0
  %v9845 = vadd.f32 0.0, %v9844
  %v9846 = vpop.f32.mrb[0].mxu0
  %9847 = vmatprep.mubr.f32.mxu0 %v9091
  %9848 = vmatmul.mubr.f32.gmra.mrb[0].mxu0 %v8579
  %v9849 = vpop.f32.mrb[0].mxu0
  %v9850 = vadd.f32 0.0, %v9849
  %v9851 = vpop.f32.mrb[0].mxu0
  %9852 = vmatprep.mubr.f32.mxu0 %v9092
  %9853 = vmatmul.mubr.f32.gmra.mrb[0].mxu0 %v8580
  %v9854 = vpop.f32.mrb[0].mxu0
  %v9855 = vadd.f32 0.0, %v9854
  %v9856 = vpop.f32.mrb[0].mxu0
  %9857 = vmatprep.mubr.f32.mxu0 %v9093
  %9858 = vmatmul.mubr.f32.gmra.mrb[0].mxu0 %v8581
  %v9859 = vpop.f32.mrb[0].mxu0
  %v9860 = vadd.f32 0.0, %v9859
  %v9861 = vpop.f32.mrb[0].mxu0
  %9862 = vmatprep.mubr.f32.mxu0 %v9110
  %9863 = vmatmul.mubr.f32.gmra.mrb[0].mxu0 %v8598
  %v9864 = vpop.f32.mrb[0].mxu0
  %v9865 = vadd.f32 0.0, %v9864
  %v9866 = vpop.f32.mrb[0].mxu0
  %9867 = vmatprep.mubr.f32.mxu0 %v9111
  %9868 = vmatmul.mubr.f32.gmra.mrb[0].mxu0 %v8599
  %v9869 = vpop.f32.mrb[0].mxu0
  %v9870 = vadd.f32 0.0, %v9869
  %v9871 = vpop.f32.mrb[0].mxu0
  %9872 = vmatprep.mubr.f32.mxu0 %v9112
  %9873 = vmatmul.mubr.f32.gmra.mrb[0].mxu0 %v8600
  %v9874 = vpop.f32.mrb[0].mxu0
  %v9875 = vadd.f32 0.0, %v9874
  %v9876 = vpop.f32.mrb[0].mxu0
  %9877 = vmatprep.mubr.f32.mxu0 %v9113
  %9878 = vmatmul.mubr.f32.gmra.mrb[0].mxu0 %v8601
  %v9879 = vpop.f32.mrb[0].mxu0
  %v9880 = vadd.f32 0.0, %v9879
  %v9881 = vpop.f32.mrb[0].mxu0
  %9882 = vmatprep.mubr.f32.mxu0 %v9114
  %9883 = vmatmul.mubr.f32.gmra.mrb[0].mxu0 %v8602
  %v9884 = vpop.f32.mrb[0].mxu0
  %v9885 = vadd.f32 0.0, %v9884
  %v9886 = vpop.f32.mrb[0].mxu0
  %9887 = vmatprep.mubr.f32.mxu0 %v9115
  %9888 = vmatmul.mubr.f32.gmra.mrb[0].mxu0 %v8603
  %v9889 = vpop.f32.mrb[0].mxu0
  %v9890 = vadd.f32 0.0, %v9889
  %v9891 = vpop.f32.mrb[0].mxu0
  %9892 = vmatprep.mubr.f32.mxu0 %v9116
  %9893 = vmatmul.mubr.f32.gmra.mrb[0].mxu0 %v8604
  %v9894 = vpop.f32.mrb[0].mxu0
  %v9895 = vadd.f32 0.0, %v9894
  %v9896 = vpop.f32.mrb[0].mxu0
  %9897 = vmatprep.mubr.f32.mxu0 %v9117
  %9898 = vmatmul.mubr.f32.gmra.mrb[0].mxu0 %v8605
  %v9899 = vpop.f32.mrb[0].mxu0
  %v9900 = vadd.f32 0.0, %v9899
  %v9901 = vpop.f32.mrb[0].mxu0
  %9902 = vmatprep.mubr.f32.mxu0 %v9118
  %9903 = vmatmul.mubr.f32.gmra.mrb[0].mxu0 %v8606
  %v9904 = vpop.f32.mrb[0].mxu0
  %v9905 = vadd.f32 0.0, %v9904
  %v9906 = vpop.f32.mrb[0].mxu0
  %9907 = vmatprep.mubr.f32.mxu0 %v9119
  %9908 = vmatmul.mubr.f32.gmra.mrb[0].mxu0 %v8607
  %v9909 = vpop.f32.mrb[0].mxu0
  %v9910 = vadd.f32 0.0, %v9909
  %v9911 = vpop.f32.mrb[0].mxu0
  %9912 = vmatprep.mubr.f32.mxu0 %v9120
  %9913 = vmatmul.mubr.f32.gmra.mrb[0].mxu0 %v8608
  %v9914 = vpop.f32.mrb[0].mxu0
  %v9915 = vadd.f32 0.0, %v9914
  %v9916 = vpop.f32.mrb[0].mxu0
  %9917 = vmatprep.mubr.f32.mxu0 %v9121
  %9918 = vmatmul.mubr.f32.gmra.mrb[0].mxu0 %v8609
  %v9919 = vpop.f32.mrb[0].mxu0
  %v9920 = vadd.f32 0.0, %v9919
  %v9921 = vpop.f32.mrb[0].mxu0
  %9922 = vmatprep.mubr.f32.mxu0 %v9122
  %9923 = vmatmul.mubr.f32.gmra.mrb[0].mxu0 %v8610
  %v9924 = vpop.f32.mrb[0].mxu0
  %v9925 = vadd.f32 0.0, %v9924
  %v9926 = vpop.f32.mrb[0].mxu0
  %9927 = vmatprep.mubr.f32.mxu0 %v9123
  %9928 = vmatmul.mubr.f32.gmra.mrb[0].mxu0 %v8611
  %v9929 = vpop.f32.mrb[0].mxu0
  %v9930 = vadd.f32 0.0, %v9929
  %v9931 = vpop.f32.mrb[0].mxu0
  %9932 = vmatprep.mubr.f32.mxu0 %v9124
  %9933 = vmatmul.mubr.f32.gmra.mrb[0].mxu0 %v8612
  %v9934 = vpop.f32.mrb[0].mxu0
  %v9935 = vadd.f32 0.0, %v9934
  %v9936 = vpop.f32.mrb[0].mxu0
  %9937 = vmatprep.mubr.f32.mxu0 %v9125
  %9938 = vmatmul.mubr.f32.gmra.mrb[0].mxu0 %v8613
  %v9939 = vpop.f32.mrb[0].mxu0
  %v9940 = vadd.f32 0.0, %v9939
  %v9941 = vpop.f32.mrb[0].mxu0
  %9942 = vmatprep.mubr.f32.mxu0 %v9142
  %9943 = vmatmul.mubr.f32.gmra.mrb[0].mxu0 %v8630
  %v9944 = vpop.f32.mrb[0].mxu0
  %v9945 = vadd.f32 0.0, %v9944
  %v9946 = vpop.f32.mrb[0].mxu0
  %9947 = vmatprep.mubr.f32.mxu0 %v9143
  %9948 = vmatmul.mubr.f32.gmra.mrb[0].mxu0 %v8631
  %v9949 = vpop.f32.mrb[0].mxu0
  %v9950 = vadd.f32 0.0, %v9949
  %v9951 = vpop.f32.mrb[0].mxu0
  %9952 = vmatprep.mubr.f32.mxu0 %v9144
  %9953 = vmatmul.mubr.f32.gmra.mrb[0].mxu0 %v8632
  %v9954 = vpop.f32.mrb[0].mxu0
  %v9955 = vadd.f32 0.0, %v9954
  %v9956 = vpop.f32.mrb[0].mxu0
  %9957 = vmatprep.mubr.f32.mxu0 %v9145
  %9958 = vmatmul.mubr.f32.gmra.mrb[0].mxu0 %v8633
  %v9959 = vpop.f32.mrb[0].mxu0
  %v9960 = vadd.f32 0.0, %v9959
  %v9961 = vpop.f32.mrb[0].mxu0
  %9962 = vmatprep.mubr.f32.mxu0 %v9146
  %9963 = vmatmul.mubr.f32.gmra.mrb[0].mxu0 %v8634
  %v9964 = vpop.f32.mrb[0].mxu0
  %v9965 = vadd.f32 0.0, %v9964
  %v9966 = vpop.f32.mrb[0].mxu0
  %9967 = vmatprep.mubr.f32.mxu0 %v9147
  %9968 = vmatmul.mubr.f32.gmra.mrb[0].mxu0 %v8635
  %v9969 = vpop.f32.mrb[0].mxu0
  %v9970 = vadd.f32 0.0, %v9969
  %v9971 = vpop.f32.mrb[0].mxu0
  %9972 = vmatprep.mubr.f32.mxu0 %v9148
  %9973 = vmatmul.mubr.f32.gmra.mrb[0].mxu0 %v8636
  %v9974 = vpop.f32.mrb[0].mxu0
  %v9975 = vadd.f32 0.0, %v9974
  %v9976 = vpop.f32.mrb[0].mxu0
  %9977 = vmatprep.mubr.f32.mxu0 %v9149
  %9978 = vmatmul.mubr.f32.gmra.mrb[0].mxu0 %v8637
  %v9979 = vpop.f32.mrb[0].mxu0
  %v9980 = vadd.f32 0.0, %v9979
  %v9981 = vpop.f32.mrb[0].mxu0
  %9982 = vmatprep.mubr.f32.mxu0 %v9150
  %9983 = vmatmul.mubr.f32.gmra.mrb[0].mxu0 %v8638
  %v9984 = vpop.f32.mrb[0].mxu0
  %v9985 = vadd.f32 0.0, %v9984
  %v9986 = vpop.f32.mrb[0].mxu0
  %9987 = vmatprep.mubr.f32.mxu0 %v9151
  %9988 = vmatmul.mubr.f32.gmra.mrb[0].mxu0 %v8639
  %v9989 = vpop.f32.mrb[0].mxu0
  %v9990 = vadd.f32 0.0, %v9989
  %v9991 = vpop.f32.mrb[0].mxu0
  %9992 = vmatprep.mubr.f32.mxu0 %v9152
  %9993 = vmatmul.mubr.f32.gmra.mrb[0].mxu0 %v8640
  %v9994 = vpop.f32.mrb[0].mxu0
  %v9995 = vadd.f32 0.0, %v9994
  %v9996 = vpop.f32.mrb[0].mxu0
  %9997 = vmatprep.mubr.f32.mxu0 %v9153
  %9998 = vmatmul.mubr.f32.gmra.mrb[0].mxu0 %v8641
  %v9999 = vpop.f32.mrb[0].mxu0
  %v10000 = vadd.f32 0.0, %v9999
  %v10001 = vpop.f32.mrb[0].mxu0
  %10002 = vmatprep.mubr.f32.mxu0 %v9154
  %10003 = vmatmul.mubr.f32.gmra.mrb[0].mxu0 %v8642
  %v10004 = vpop.f32.mrb[0].mxu0
  %v10005 = vadd.f32 0.0, %v10004
  %v10006 = vpop.f32.mrb[0].mxu0
  %10007 = vmatprep.mubr.f32.mxu0 %v9155
  %10008 = vmatmul.mubr.f32.gmra.mrb[0].mxu0 %v8643
  %v10009 = vpop.f32.mrb[0].mxu0
  %v10010 = vadd.f32 0.0, %v10009
  %v10011 = vpop.f32.mrb[0].mxu0
  %10012 = vmatprep.mubr.f32.mxu0 %v9156
  %10013 = vmatmul.mubr.f32.gmra.mrb[0].mxu0 %v8644
  %v10014 = vpop.f32.mrb[0].mxu0
  %v10015 = vadd.f32 0.0, %v10014
  %v10016 = vpop.f32.mrb[0].mxu0
  %10017 = vmatprep.mubr.f32.mxu0 %v9157
  %10018 = vmatmul.mubr.f32.gmra.mrb[0].mxu0 %v8645
  %v10019 = vpop.f32.mrb[0].mxu0
  %v10020 = vadd.f32 0.0, %v10019
  %v10021 = vpop.f32.mrb[0].mxu0
  %10022 = vmatprep.mubr.f32.mxu0 %v9174
  %10023 = vmatmul.mubr.f32.gmra.mrb[0].mxu0 %v8662
  %v10024 = vpop.f32.mrb[0].mxu0
  %v10025 = vadd.f32 0.0, %v10024
  %v10026 = vpop.f32.mrb[0].mxu0
  %10027 = vmatprep.mubr.f32.mxu0 %v9175
  %10028 = vmatmul.mubr.f32.gmra.mrb[0].mxu0 %v8663
  %v10029 = vpop.f32.mrb[0].mxu0
  %v10030 = vadd.f32 0.0, %v10029
  %v10031 = vpop.f32.mrb[0].mxu0
  %10032 = vmatprep.mubr.f32.mxu0 %v9176
  %10033 = vmatmul.mubr.f32.gmra.mrb[0].mxu0 %v8664
  %v10034 = vpop.f32.mrb[0].mxu0
  %v10035 = vadd.f32 0.0, %v10034
  %v10036 = vpop.f32.mrb[0].mxu0
  %10037 = vmatprep.mubr.f32.mxu0 %v9177
  %10038 = vmatmul.mubr.f32.gmra.mrb[0].mxu0 %v8665
  %v10039 = vpop.f32.mrb[0].mxu0
  %v10040 = vadd.f32 0.0, %v10039
  %v10041 = vpop.f32.mrb[0].mxu0
  %10042 = vmatprep.mubr.f32.mxu0 %v9178
  %10043 = vmatmul.mubr.f32.gmra.mrb[0].mxu0 %v8666
  %v10044 = vpop.f32.mrb[0].mxu0
  %v10045 = vadd.f32 0.0, %v10044
  %v10046 = vpop.f32.mrb[0].mxu0
  %10047 = vmatprep.mubr.f32.mxu0 %v9179
  %10048 = vmatmul.mubr.f32.gmra.mrb[0].mxu0 %v8667
  %v10049 = vpop.f32.mrb[0].mxu0
  %v10050 = vadd.f32 0.0, %v10049
  %v10051 = vpop.f32.mrb[0].mxu0
  %10052 = vmatprep.mubr.f32.mxu0 %v9180
  %10053 = vmatmul.mubr.f32.gmra.mrb[0].mxu0 %v8668
  %v10054 = vpop.f32.mrb[0].mxu0
  %v10055 = vadd.f32 0.0, %v10054
  %v10056 = vpop.f32.mrb[0].mxu0
  %10057 = vmatprep.mubr.f32.mxu0 %v9181
  %10058 = vmatmul.mubr.f32.gmra.mrb[0].mxu0 %v8669
  %v10059 = vpop.f32.mrb[0].mxu0
  %v10060 = vadd.f32 0.0, %v10059
  %v10061 = vpop.f32.mrb[0].mxu0
  %10062 = vmatprep.mubr.f32.mxu0 %v9182
  %10063 = vmatmul.mubr.f32.gmra.mrb[0].mxu0 %v8670
  %v10064 = vpop.f32.mrb[0].mxu0
  %v10065 = vadd.f32 0.0, %v10064
  %v10066 = vpop.f32.mrb[0].mxu0
  %10067 = vmatprep.mubr.f32.mxu0 %v9183
  %10068 = vmatmul.mubr.f32.gmra.mrb[0].mxu0 %v8671
  %v10069 = vpop.f32.mrb[0].mxu0
  %v10070 = vadd.f32 0.0, %v10069
  %v10071 = vpop.f32.mrb[0].mxu0
  %10072 = vmatprep.mubr.f32.mxu0 %v9184
  %10073 = vmatmul.mubr.f32.gmra.mrb[0].mxu0 %v8672
  %v10074 = vpop.f32.mrb[0].mxu0
  %v10075 = vadd.f32 0.0, %v10074
  %v10076 = vpop.f32.mrb[0].mxu0
  %10077 = vmatprep.mubr.f32.mxu0 %v9185
  %10078 = vmatmul.mubr.f32.gmra.mrb[0].mxu0 %v8673
  %v10079 = vpop.f32.mrb[0].mxu0
  %v10080 = vadd.f32 0.0, %v10079
  %v10081 = vpop.f32.mrb[0].mxu0
  %10082 = vmatprep.mubr.f32.mxu0 %v9186
  %10083 = vmatmul.mubr.f32.gmra.mrb[0].mxu0 %v8674
  %v10084 = vpop.f32.mrb[0].mxu0
  %v10085 = vadd.f32 0.0, %v10084
  %v10086 = vpop.f32.mrb[0].mxu0
  %10087 = vmatprep.mubr.f32.mxu0 %v9187
  %10088 = vmatmul.mubr.f32.gmra.mrb[0].mxu0 %v8675
  %v10089 = vpop.f32.mrb[0].mxu0
  %v10090 = vadd.f32 0.0, %v10089
  %v10091 = vpop.f32.mrb[0].mxu0
  %10092 = vmatprep.mubr.f32.mxu0 %v9188
  %10093 = vmatmul.mubr.f32.gmra.mrb[0].mxu0 %v8676
  %v10094 = vpop.f32.mrb[0].mxu0
  %v10095 = vadd.f32 0.0, %v10094
  %v10096 = vpop.f32.mrb[0].mxu0
  %10097 = vmatprep.mubr.f32.mxu0 %v9189
  %10098 = vmatmul.mubr.f32.gmra.mrb[0].mxu0 %v8677
  %v10099 = vpop.f32.mrb[0].mxu0
  %v10100 = vadd.f32 0.0, %v10099
  %v10101 = vpop.f32.mrb[0].mxu0
  %10102 = vmatprep.mubr.f32.mxu0 %v9206
  %10103 = vmatmul.mubr.f32.gmra.mrb[0].mxu0 %v8694
  %v10104 = vpop.f32.mrb[0].mxu0
  %v10105 = vadd.f32 0.0, %v10104
  %v10106 = vpop.f32.mrb[0].mxu0
  %10107 = vmatprep.mubr.f32.mxu0 %v9207
  %10108 = vmatmul.mubr.f32.gmra.mrb[0].mxu0 %v8695
  %v10109 = vpop.f32.mrb[0].mxu0
  %v10110 = vadd.f32 0.0, %v10109
  %v10111 = vpop.f32.mrb[0].mxu0
  %10112 = vmatprep.mubr.f32.mxu0 %v9208
  %10113 = vmatmul.mubr.f32.gmra.mrb[0].mxu0 %v8696
  %v10114 = vpop.f32.mrb[0].mxu0
  %v10115 = vadd.f32 0.0, %v10114
  %v10116 = vpop.f32.mrb[0].mxu0
  %10117 = vmatprep.mubr.f32.mxu0 %v9209
  %10118 = vmatmul.mubr.f32.gmra.mrb[0].mxu0 %v8697
  %v10119 = vpop.f32.mrb[0].mxu0
  %v10120 = vadd.f32 0.0, %v10119
  %v10121 = vpop.f32.mrb[0].mxu0
  %10122 = vmatprep.mubr.f32.mxu0 %v9210
  %10123 = vmatmul.mubr.f32.gmra.mrb[0].mxu0 %v8698
  %v10124 = vpop.f32.mrb[0].mxu0
  %v10125 = vadd.f32 0.0, %v10124
  %v10126 = vpop.f32.mrb[0].mxu0
  %10127 = vmatprep.mubr.f32.mxu0 %v9211
  %10128 = vmatmul.mubr.f32.gmra.mrb[0].mxu0 %v8699
  %v10129 = vpop.f32.mrb[0].mxu0
  %v10130 = vadd.f32 0.0, %v10129
  %v10131 = vpop.f32.mrb[0].mxu0
  %10132 = vmatprep.mubr.f32.mxu0 %v9212
  %10133 = vmatmul.mubr.f32.gmra.mrb[0].mxu0 %v8700
  %v10134 = vpop.f32.mrb[0].mxu0
  %v10135 = vadd.f32 0.0, %v10134
  %v10136 = vpop.f32.mrb[0].mxu0
  %10137 = vmatprep.mubr.f32.mxu0 %v9213
  %10138 = vmatmul.mubr.f32.gmra.mrb[0].mxu0 %v8701
  %v10139 = vpop.f32.mrb[0].mxu0
  %v10140 = vadd.f32 0.0, %v10139
  %v10141 = vpop.f32.mrb[0].mxu0
  %10142 = vmatprep.mubr.f32.mxu0 %v9214
  %10143 = vmatmul.mubr.f32.gmra.mrb[0].mxu0 %v8702
  %v10144 = vpop.f32.mrb[0].mxu0
  %v10145 = vadd.f32 0.0, %v10144
  %v10146 = vpop.f32.mrb[0].mxu0
  %10147 = vmatprep.mubr.f32.mxu0 %v9215
  %10148 = vmatmul.mubr.f32.gmra.mrb[0].mxu0 %v8703
  %v10149 = vpop.f32.mrb[0].mxu0
  %v10150 = vadd.f32 0.0, %v10149
  %v10151 = vpop.f32.mrb[0].mxu0
  %10152 = vmatprep.mubr.f32.mxu0 %v9216
  %10153 = vmatmul.mubr.f32.gmra.mrb[0].mxu0 %v8704
  %v10154 = vpop.f32.mrb[0].mxu0
  %v10155 = vadd.f32 0.0, %v10154
  %v10156 = vpop.f32.mrb[0].mxu0
  %10157 = vmatprep.mubr.f32.mxu0 %v9217
  %10158 = vmatmul.mubr.f32.gmra.mrb[0].mxu0 %v8705
  %v10159 = vpop.f32.mrb[0].mxu0
  %v10160 = vadd.f32 0.0, %v10159
  %v10161 = vpop.f32.mrb[0].mxu0
  %10162 = vmatprep.mubr.f32.mxu0 %v9218
  %10163 = vmatmul.mubr.f32.gmra.mrb[0].mxu0 %v8706
  %v10164 = vpop.f32.mrb[0].mxu0
  %v10165 = vadd.f32 0.0, %v10164
  %v10166 = vpop.f32.mrb[0].mxu0
  %10167 = vmatprep.mubr.f32.mxu0 %v9219
  %10168 = vmatmul.mubr.f32.gmra.mrb[0].mxu0 %v8707
  %v10169 = vpop.f32.mrb[0].mxu0
  %v10170 = vadd.f32 0.0, %v10169
  %v10171 = vpop.f32.mrb[0].mxu0
  %10172 = vmatprep.mubr.f32.mxu0 %v9220
  %10173 = vmatmul.mubr.f32.gmra.mrb[0].mxu0 %v8708
  %v10174 = vpop.f32.mrb[0].mxu0
  %v10175 = vadd.f32 0.0, %v10174
  %v10176 = vpop.f32.mrb[0].mxu0
  %10177 = vmatprep.mubr.f32.mxu0 %v9221
  %10178 = vmatmul.mubr.f32.gmra.mrb[0].mxu0 %v8709
  %v10179 = vpop.f32.mrb[0].mxu0
  %v10180 = vadd.f32 0.0, %v10179
  %v10181 = vpop.f32.mrb[0].mxu0
  %10182 = vmatprep.mubr.f32.mxu0 %v9238
  %10183 = vmatmul.mubr.f32.gmra.mrb[0].mxu0 %v8726
  %v10184 = vpop.f32.mrb[0].mxu0
  %v10185 = vadd.f32 0.0, %v10184
  %v10186 = vpop.f32.mrb[0].mxu0
  %10187 = vmatprep.mubr.f32.mxu0 %v9239
  %10188 = vmatmul.mubr.f32.gmra.mrb[0].mxu0 %v8727
  %v10189 = vpop.f32.mrb[0].mxu0
  %v10190 = vadd.f32 0.0, %v10189
  %v10191 = vpop.f32.mrb[0].mxu0
  %10192 = vmatprep.mubr.f32.mxu0 %v9240
  %10193 = vmatmul.mubr.f32.gmra.mrb[0].mxu0 %v8728
  %v10194 = vpop.f32.mrb[0].mxu0
  %v10195 = vadd.f32 0.0, %v10194
  %v10196 = vpop.f32.mrb[0].mxu0
  %10197 = vmatprep.mubr.f32.mxu0 %v9241
  %10198 = vmatmul.mubr.f32.gmra.mrb[0].mxu0 %v8729
  %v10199 = vpop.f32.mrb[0].mxu0
  %v10200 = vadd.f32 0.0, %v10199
  %v10201 = vpop.f32.mrb[0].mxu0
  %10202 = vmatprep.mubr.f32.mxu0 %v9242
  %10203 = vmatmul.mubr.f32.gmra.mrb[0].mxu0 %v8730
  %v10204 = vpop.f32.mrb[0].mxu0
  %v10205 = vadd.f32 0.0, %v10204
  %v10206 = vpop.f32.mrb[0].mxu0
  %10207 = vmatprep.mubr.f32.mxu0 %v9243
  %10208 = vmatmul.mubr.f32.gmra.mrb[0].mxu0 %v8731
  %v10209 = vpop.f32.mrb[0].mxu0
  %v10210 = vadd.f32 0.0, %v10209
  %v10211 = vpop.f32.mrb[0].mxu0
  %10212 = vmatprep.mubr.f32.mxu0 %v9244
  %10213 = vmatmul.mubr.f32.gmra.mrb[0].mxu0 %v8732
  %v10214 = vpop.f32.mrb[0].mxu0
  %v10215 = vadd.f32 0.0, %v10214
  %v10216 = vpop.f32.mrb[0].mxu0
  %10217 = vmatprep.mubr.f32.mxu0 %v9245
  %10218 = vmatmul.mubr.f32.gmra.mrb[0].mxu0 %v8733
  %v10219 = vpop.f32.mrb[0].mxu0
  %v10220 = vadd.f32 0.0, %v10219
  %v10221 = vpop.f32.mrb[0].mxu0
  %10222 = vmatprep.mubr.f32.mxu0 %v9246
  %10223 = vmatmul.mubr.f32.gmra.mrb[0].mxu0 %v8734
  %v10224 = vpop.f32.mrb[0].mxu0
  %v10225 = vadd.f32 0.0, %v10224
  %v10226 = vpop.f32.mrb[0].mxu0
  %10227 = vmatprep.mubr.f32.mxu0 %v9247
  %10228 = vmatmul.mubr.f32.gmra.mrb[0].mxu0 %v8735
  %v10229 = vpop.f32.mrb[0].mxu0
  %v10230 = vadd.f32 0.0, %v10229
  %v10231 = vpop.f32.mrb[0].mxu0
  %10232 = vmatprep.mubr.f32.mxu0 %v9248
  %10233 = vmatmul.mubr.f32.gmra.mrb[0].mxu0 %v8736
  %v10234 = vpop.f32.mrb[0].mxu0
  %v10235 = vadd.f32 0.0, %v10234
  %v10236 = vpop.f32.mrb[0].mxu0
  %10237 = vmatprep.mubr.f32.mxu0 %v9249
  %10238 = vmatmul.mubr.f32.gmra.mrb[0].mxu0 %v8737
  %v10239 = vpop.f32.mrb[0].mxu0
  %v10240 = vadd.f32 0.0, %v10239
  %v10241 = vpop.f32.mrb[0].mxu0
  %10242 = vmatprep.mubr.f32.mxu0 %v9250
  %10243 = vmatmul.mubr.f32.gmra.mrb[0].mxu0 %v8738
  %v10244 = vpop.f32.mrb[0].mxu0
  %v10245 = vadd.f32 0.0, %v10244
  %v10246 = vpop.f32.mrb[0].mxu0
  %10247 = vmatprep.mubr.f32.mxu0 %v9251
  %10248 = vmatmul.mubr.f32.gmra.mrb[0].mxu0 %v8739
  %v10249 = vpop.f32.mrb[0].mxu0
  %v10250 = vadd.f32 0.0, %v10249
  %v10251 = vpop.f32.mrb[0].mxu0
  %10252 = vmatprep.mubr.f32.mxu0 %v9252
  %10253 = vmatmul.mubr.f32.gmra.mrb[0].mxu0 %v8740
  %v10254 = vpop.f32.mrb[0].mxu0
  %v10255 = vadd.f32 0.0, %v10254
  %v10256 = vpop.f32.mrb[0].mxu0
  %10257 = vmatprep.mubr.f32.mxu0 %v9253
  %10258 = vmatmul.mubr.f32.gmra.mrb[0].mxu0 %v8741
  %v10259 = vpop.f32.mrb[0].mxu0
  %v10260 = vadd.f32 0.0, %v10259
  %v10261 = vpop.f32.mrb[0].mxu0
  %10262 = vmatprep.mubr.f32.mxu0 %v9270
  %10263 = vmatmul.mubr.f32.gmra.mrb[0].mxu0 %v8758
  %v10264 = vpop.f32.mrb[0].mxu0
  %v10265 = vadd.f32 0.0, %v10264
  %v10266 = vpop.f32.mrb[0].mxu0
  %10267 = vmatprep.mubr.f32.mxu0 %v9271
  %10268 = vmatmul.mubr.f32.gmra.mrb[0].mxu0 %v8759
  %v10269 = vpop.f32.mrb[0].mxu0
  %v10270 = vadd.f32 0.0, %v10269
  %v10271 = vpop.f32.mrb[0].mxu0
  %10272 = vmatprep.mubr.f32.mxu0 %v9272
  %10273 = vmatmul.mubr.f32.gmra.mrb[0].mxu0 %v8760
  %v10274 = vpop.f32.mrb[0].mxu0
  %v10275 = vadd.f32 0.0, %v10274
  %v10276 = vpop.f32.mrb[0].mxu0
  %10277 = vmatprep.mubr.f32.mxu0 %v9273
  %10278 = vmatmul.mubr.f32.gmra.mrb[0].mxu0 %v8761
  %v10279 = vpop.f32.mrb[0].mxu0
  %v10280 = vadd.f32 0.0, %v10279
  %v10281 = vpop.f32.mrb[0].mxu0
  %10282 = vmatprep.mubr.f32.mxu0 %v9274
  %10283 = vmatmul.mubr.f32.gmra.mrb[0].mxu0 %v8762
  %v10284 = vpop.f32.mrb[0].mxu0
  %v10285 = vadd.f32 0.0, %v10284
  %v10286 = vpop.f32.mrb[0].mxu0
  %10287 = vmatprep.mubr.f32.mxu0 %v9275
  %10288 = vmatmul.mubr.f32.gmra.mrb[0].mxu0 %v8763
  %v10289 = vpop.f32.mrb[0].mxu0
  %v10290 = vadd.f32 0.0, %v10289
  %v10291 = vpop.f32.mrb[0].mxu0
  %10292 = vmatprep.mubr.f32.mxu0 %v9276
  %10293 = vmatmul.mubr.f32.gmra.mrb[0].mxu0 %v8764
  %v10294 = vpop.f32.mrb[0].mxu0
  %v10295 = vadd.f32 0.0, %v10294
  %v10296 = vpop.f32.mrb[0].mxu0
  %10297 = vmatprep.mubr.f32.mxu0 %v9277
  %10298 = vmatmul.mubr.f32.gmra.mrb[0].mxu0 %v8765
  %v10299 = vpop.f32.mrb[0].mxu0
  %v10300 = vadd.f32 0.0, %v10299
  %v10301 = vpop.f32.mrb[0].mxu0
  %10302 = vmatprep.mubr.f32.mxu0 %v9278
  %10303 = vmatmul.mubr.f32.gmra.mrb[0].mxu0 %v8766
  %v10304 = vpop.f32.mrb[0].mxu0
  %v10305 = vadd.f32 0.0, %v10304
  %v10306 = vpop.f32.mrb[0].mxu0
  %10307 = vmatprep.mubr.f32.mxu0 %v9279
  %10308 = vmatmul.mubr.f32.gmra.mrb[0].mxu0 %v8767
  %v10309 = vpop.f32.mrb[0].mxu0
  %v10310 = vadd.f32 0.0, %v10309
  %v10311 = vpop.f32.mrb[0].mxu0
  %10312 = vmatprep.mubr.f32.mxu0 %v9280
  %10313 = vmatmul.mubr.f32.gmra.mrb[0].mxu0 %v8768
  %v10314 = vpop.f32.mrb[0].mxu0
  %v10315 = vadd.f32 0.0, %v10314
  %v10316 = vpop.f32.mrb[0].mxu0
  %10317 = vmatprep.mubr.f32.mxu0 %v9281
  %10318 = vmatmul.mubr.f32.gmra.mrb[0].mxu0 %v8769
  %v10319 = vpop.f32.mrb[0].mxu0
  %v10320 = vadd.f32 0.0, %v10319
  %v10321 = vpop.f32.mrb[0].mxu0
  %10322 = vmatprep.mubr.f32.mxu0 %v9282
  %10323 = vmatmul.mubr.f32.gmra.mrb[0].mxu0 %v8770
  %v10324 = vpop.f32.mrb[0].mxu0
  %v10325 = vadd.f32 0.0, %v10324
  %v10326 = vpop.f32.mrb[0].mxu0
  %10327 = vmatprep.mubr.f32.mxu0 %v9283
  %10328 = vmatmul.mubr.f32.gmra.mrb[0].mxu0 %v8771
  %v10329 = vpop.f32.mrb[0].mxu0
  %v10330 = vadd.f32 0.0, %v10329
  %v10331 = vpop.f32.mrb[0].mxu0
  %10332 = vmatprep.mubr.f32.mxu0 %v9284
  %10333 = vmatmul.mubr.f32.gmra.mrb[0].mxu0 %v8772
  %v10334 = vpop.f32.mrb[0].mxu0
  %v10335 = vadd.f32 0.0, %v10334
  %v10336 = vpop.f32.mrb[0].mxu0
  %10337 = vmatprep.mubr.f32.mxu0 %v9285
  %10338 = vmatmul.mubr.f32.gmra.mrb[0].mxu0 %v8773
  %v10339 = vpop.f32.mrb[0].mxu0
  %v10340 = vadd.f32 0.0, %v10339
  %v10341 = vpop.f32.mrb[0].mxu0
  %10342 = vmatprep.mubr.f32.mxu0 %v9302
  %10343 = vmatmul.mubr.f32.gmra.mrb[0].mxu0 %v8790
  %v10344 = vpop.f32.mrb[0].mxu0
  %v10345 = vadd.f32 0.0, %v10344
  %v10346 = vpop.f32.mrb[0].mxu0
  %10347 = vmatprep.mubr.f32.mxu0 %v9303
  %10348 = vmatmul.mubr.f32.gmra.mrb[0].mxu0 %v8791
  %v10349 = vpop.f32.mrb[0].mxu0
  %v10350 = vadd.f32 0.0, %v10349
  %v10351 = vpop.f32.mrb[0].mxu0
  %10352 = vmatprep.mubr.f32.mxu0 %v9304
  %10353 = vmatmul.mubr.f32.gmra.mrb[0].mxu0 %v8792
  %v10354 = vpop.f32.mrb[0].mxu0
  %v10355 = vadd.f32 0.0, %v10354
  %v10356 = vpop.f32.mrb[0].mxu0
  %10357 = vmatprep.mubr.f32.mxu0 %v9305
  %10358 = vmatmul.mubr.f32.gmra.mrb[0].mxu0 %v8793
  %v10359 = vpop.f32.mrb[0].mxu0
  %v10360 = vadd.f32 0.0, %v10359
  %v10361 = vpop.f32.mrb[0].mxu0
  %10362 = vmatprep.mubr.f32.mxu0 %v9306
  %10363 = vmatmul.mubr.f32.gmra.mrb[0].mxu0 %v8794
  %v10364 = vpop.f32.mrb[0].mxu0
  %v10365 = vadd.f32 0.0, %v10364
  %v10366 = vpop.f32.mrb[0].mxu0
  %10367 = vmatprep.mubr.f32.mxu0 %v9307
  %10368 = vmatmul.mubr.f32.gmra.mrb[0].mxu0 %v8795
  %v10369 = vpop.f32.mrb[0].mxu0
  %v10370 = vadd.f32 0.0, %v10369
  %v10371 = vpop.f32.mrb[0].mxu0
  %10372 = vmatprep.mubr.f32.mxu0 %v9308
  %10373 = vmatmul.mubr.f32.gmra.mrb[0].mxu0 %v8796
  %v10374 = vpop.f32.mrb[0].mxu0
  %v10375 = vadd.f32 0.0, %v10374
  %v10376 = vpop.f32.mrb[0].mxu0
  %10377 = vmatprep.mubr.f32.mxu0 %v9309
  %10378 = vmatmul.mubr.f32.gmra.mrb[0].mxu0 %v8797
  %v10379 = vpop.f32.mrb[0].mxu0
  %v10380 = vadd.f32 0.0, %v10379
  %v10381 = vpop.f32.mrb[0].mxu0
  %10382 = vmatprep.mubr.f32.mxu0 %v9310
  %10383 = vmatmul.mubr.f32.gmra.mrb[0].mxu0 %v8798
  %v10384 = vpop.f32.mrb[0].mxu0
  %v10385 = vadd.f32 0.0, %v10384
  %v10386 = vpop.f32.mrb[0].mxu0
  %10387 = vmatprep.mubr.f32.mxu0 %v9311
  %10388 = vmatmul.mubr.f32.gmra.mrb[0].mxu0 %v8799
  %v10389 = vpop.f32.mrb[0].mxu0
  %v10390 = vadd.f32 0.0, %v10389
  %v10391 = vpop.f32.mrb[0].mxu0
  %10392 = vmatprep.mubr.f32.mxu0 %v9312
  %10393 = vmatmul.mubr.f32.gmra.mrb[0].mxu0 %v8800
  %v10394 = vpop.f32.mrb[0].mxu0
  %v10395 = vadd.f32 0.0, %v10394
  %v10396 = vpop.f32.mrb[0].mxu0
  %10397 = vmatprep.mubr.f32.mxu0 %v9313
  %10398 = vmatmul.mubr.f32.gmra.mrb[0].mxu0 %v8801
  %v10399 = vpop.f32.mrb[0].mxu0
  %v10400 = vadd.f32 0.0, %v10399
  %v10401 = vpop.f32.mrb[0].mxu0
  %10402 = vmatprep.mubr.f32.mxu0 %v9314
  %10403 = vmatmul.mubr.f32.gmra.mrb[0].mxu0 %v8802
  %v10404 = vpop.f32.mrb[0].mxu0
  %v10405 = vadd.f32 0.0, %v10404
  %v10406 = vpop.f32.mrb[0].mxu0
  %10407 = vmatprep.mubr.f32.mxu0 %v9315
  %10408 = vmatmul.mubr.f32.gmra.mrb[0].mxu0 %v8803
  %v10409 = vpop.f32.mrb[0].mxu0
  %v10410 = vadd.f32 0.0, %v10409
  %v10411 = vpop.f32.mrb[0].mxu0
  %10412 = vmatprep.mubr.f32.mxu0 %v9316
  %10413 = vmatmul.mubr.f32.gmra.mrb[0].mxu0 %v8804
  %v10414 = vpop.f32.mrb[0].mxu0
  %v10415 = vadd.f32 0.0, %v10414
  %v10416 = vpop.f32.mrb[0].mxu0
  %10417 = vmatprep.mubr.f32.mxu0 %v9317
  %10418 = vmatmul.mubr.f32.gmra.mrb[0].mxu0 %v8805
  %v10419 = vpop.f32.mrb[0].mxu0
  %v10420 = vadd.f32 0.0, %v10419
  %v10421 = vpop.f32.mrb[0].mxu0
  %10422 = vmatprep.mubr.f32.mxu0 %v9334
  %10423 = vmatmul.mubr.f32.gmra.mrb[0].mxu0 %v8822
  %v10424 = vpop.f32.mrb[0].mxu0
  %v10425 = vadd.f32 0.0, %v10424
  %v10426 = vpop.f32.mrb[0].mxu0
  %10427 = vmatprep.mubr.f32.mxu0 %v9335
  %10428 = vmatmul.mubr.f32.gmra.mrb[0].mxu0 %v8823
  %v10429 = vpop.f32.mrb[0].mxu0
  %v10430 = vadd.f32 0.0, %v10429
  %v10431 = vpop.f32.mrb[0].mxu0
  %10432 = vmatprep.mubr.f32.mxu0 %v9336
  %10433 = vmatmul.mubr.f32.gmra.mrb[0].mxu0 %v8824
  %v10434 = vpop.f32.mrb[0].mxu0
  %v10435 = vadd.f32 0.0, %v10434
  %v10436 = vpop.f32.mrb[0].mxu0
  %10437 = vmatprep.mubr.f32.mxu0 %v9337
  %10438 = vmatmul.mubr.f32.gmra.mrb[0].mxu0 %v8825
  %v10439 = vpop.f32.mrb[0].mxu0
  %v10440 = vadd.f32 0.0, %v10439
  %v10441 = vpop.f32.mrb[0].mxu0
  %10442 = vmatprep.mubr.f32.mxu0 %v9338
  %10443 = vmatmul.mubr.f32.gmra.mrb[0].mxu0 %v8826
  %v10444 = vpop.f32.mrb[0].mxu0
  %v10445 = vadd.f32 0.0, %v10444
  %v10446 = vpop.f32.mrb[0].mxu0
  %10447 = vmatprep.mubr.f32.mxu0 %v9339
  %10448 = vmatmul.mubr.f32.gmra.mrb[0].mxu0 %v8827
  %v10449 = vpop.f32.mrb[0].mxu0
  %v10450 = vadd.f32 0.0, %v10449
  %v10451 = vpop.f32.mrb[0].mxu0
  %10452 = vmatprep.mubr.f32.mxu0 %v9340
  %10453 = vmatmul.mubr.f32.gmra.mrb[0].mxu0 %v8828
  %v10454 = vpop.f32.mrb[0].mxu0
  %v10455 = vadd.f32 0.0, %v10454
  %v10456 = vpop.f32.mrb[0].mxu0
  %10457 = vmatprep.mubr.f32.mxu0 %v9341
  %10458 = vmatmul.mubr.f32.gmra.mrb[0].mxu0 %v8829
  %v10459 = vpop.f32.mrb[0].mxu0
  %v10460 = vadd.f32 0.0, %v10459
  %v10461 = vpop.f32.mrb[0].mxu0
  %10462 = vmatprep.mubr.f32.mxu0 %v9342
  %10463 = vmatmul.mubr.f32.gmra.mrb[0].mxu0 %v8830
  %v10464 = vpop.f32.mrb[0].mxu0
  %v10465 = vadd.f32 0.0, %v10464
  %v10466 = vpop.f32.mrb[0].mxu0
  %10467 = vmatprep.mubr.f32.mxu0 %v9343
  %10468 = vmatmul.mubr.f32.gmra.mrb[0].mxu0 %v8831
  %v10469 = vpop.f32.mrb[0].mxu0
  %v10470 = vadd.f32 0.0, %v10469
  %v10471 = vpop.f32.mrb[0].mxu0
  %10472 = vmatprep.mubr.f32.mxu0 %v9344
  %10473 = vmatmul.mubr.f32.gmra.mrb[0].mxu0 %v8832
  %v10474 = vpop.f32.mrb[0].mxu0
  %v10475 = vadd.f32 0.0, %v10474
  %v10476 = vpop.f32.mrb[0].mxu0
  %10477 = vmatprep.mubr.f32.mxu0 %v9345
  %10478 = vmatmul.mubr.f32.gmra.mrb[0].mxu0 %v8833
  %v10479 = vpop.f32.mrb[0].mxu0
  %v10480 = vadd.f32 0.0, %v10479
  %v10481 = vpop.f32.mrb[0].mxu0
  %10482 = vmatprep.mubr.f32.mxu0 %v9346
  %10483 = vmatmul.mubr.f32.gmra.mrb[0].mxu0 %v8834
  %v10484 = vpop.f32.mrb[0].mxu0
  %v10485 = vadd.f32 0.0, %v10484
  %v10486 = vpop.f32.mrb[0].mxu0
  %10487 = vmatprep.mubr.f32.mxu0 %v9347
  %10488 = vmatmul.mubr.f32.gmra.mrb[0].mxu0 %v8835
  %v10489 = vpop.f32.mrb[0].mxu0
  %v10490 = vadd.f32 0.0, %v10489
  %v10491 = vpop.f32.mrb[0].mxu0
  %10492 = vmatprep.mubr.f32.mxu0 %v9348
  %10493 = vmatmul.mubr.f32.gmra.mrb[0].mxu0 %v8836
  %v10494 = vpop.f32.mrb[0].mxu0
  %v10495 = vadd.f32 0.0, %v10494
  %v10496 = vpop.f32.mrb[0].mxu0
  %10497 = vmatprep.mubr.f32.mxu0 %v9349
  %10498 = vmatmul.mubr.f32.gmra.mrb[0].mxu0 %v8837
  %v10499 = vpop.f32.mrb[0].mxu0
  %v10500 = vadd.f32 0.0, %v10499
  %v10501 = vpop.f32.mrb[0].mxu0
  %10502 = vmatprep.mubr.f32.mxu0 %v9366
  %10503 = vmatmul.mubr.f32.gmra.mrb[0].mxu0 %v8854
  %v10504 = vpop.f32.mrb[0].mxu0
  %v10505 = vadd.f32 0.0, %v10504
  %v10506 = vpop.f32.mrb[0].mxu0
  %10507 = vmatprep.mubr.f32.mxu0 %v9367
  %10508 = vmatmul.mubr.f32.gmra.mrb[0].mxu0 %v8855
  %v10509 = vpop.f32.mrb[0].mxu0
  %v10510 = vadd.f32 0.0, %v10509
  %v10511 = vpop.f32.mrb[0].mxu0
  %10512 = vmatprep.mubr.f32.mxu0 %v9368
  %10513 = vmatmul.mubr.f32.gmra.mrb[0].mxu0 %v8856
  %v10514 = vpop.f32.mrb[0].mxu0
  %v10515 = vadd.f32 0.0, %v10514
  %v10516 = vpop.f32.mrb[0].mxu0
  %10517 = vmatprep.mubr.f32.mxu0 %v9369
  %10518 = vmatmul.mubr.f32.gmra.mrb[0].mxu0 %v8857
  %v10519 = vpop.f32.mrb[0].mxu0
  %v10520 = vadd.f32 0.0, %v10519
  %v10521 = vpop.f32.mrb[0].mxu0
  %10522 = vmatprep.mubr.f32.mxu0 %v9370
  %10523 = vmatmul.mubr.f32.gmra.mrb[0].mxu0 %v8858
  %v10524 = vpop.f32.mrb[0].mxu0
  %v10525 = vadd.f32 0.0, %v10524
  %v10526 = vpop.f32.mrb[0].mxu0
  %10527 = vmatprep.mubr.f32.mxu0 %v9371
  %10528 = vmatmul.mubr.f32.gmra.mrb[0].mxu0 %v8859
  %v10529 = vpop.f32.mrb[0].mxu0
  %v10530 = vadd.f32 0.0, %v10529
  %v10531 = vpop.f32.mrb[0].mxu0
  %10532 = vmatprep.mubr.f32.mxu0 %v9372
  %10533 = vmatmul.mubr.f32.gmra.mrb[0].mxu0 %v8860
  %v10534 = vpop.f32.mrb[0].mxu0
  %v10535 = vadd.f32 0.0, %v10534
  %v10536 = vpop.f32.mrb[0].mxu0
  %10537 = vmatprep.mubr.f32.mxu0 %v9373
  %10538 = vmatmul.mubr.f32.gmra.mrb[0].mxu0 %v8861
  %v10539 = vpop.f32.mrb[0].mxu0
  %v10540 = vadd.f32 0.0, %v10539
  %v10541 = vpop.f32.mrb[0].mxu0
  %10542 = vmatprep.mubr.f32.mxu0 %v9374
  %10543 = vmatmul.mubr.f32.gmra.mrb[0].mxu0 %v8862
  %v10544 = vpop.f32.mrb[0].mxu0
  %v10545 = vadd.f32 0.0, %v10544
  %v10546 = vpop.f32.mrb[0].mxu0
  %10547 = vmatprep.mubr.f32.mxu0 %v9375
  %10548 = vmatmul.mubr.f32.gmra.mrb[0].mxu0 %v8863
  %v10549 = vpop.f32.mrb[0].mxu0
  %v10550 = vadd.f32 0.0, %v10549
  %v10551 = vpop.f32.mrb[0].mxu0
  %10552 = vmatprep.mubr.f32.mxu0 %v9376
  %10553 = vmatmul.mubr.f32.gmra.mrb[0].mxu0 %v8864
  %v10554 = vpop.f32.mrb[0].mxu0
  %v10555 = vadd.f32 0.0, %v10554
  %v10556 = vpop.f32.mrb[0].mxu0
  %10557 = vmatprep.mubr.f32.mxu0 %v9377
  %10558 = vmatmul.mubr.f32.gmra.mrb[0].mxu0 %v8865
  %v10559 = vpop.f32.mrb[0].mxu0
  %v10560 = vadd.f32 0.0, %v10559
  %v10561 = vpop.f32.mrb[0].mxu0
  %10562 = vmatprep.mubr.f32.mxu0 %v9378
  %10563 = vmatmul.mubr.f32.gmra.mrb[0].mxu0 %v8866
  %v10564 = vpop.f32.mrb[0].mxu0
  %v10565 = vadd.f32 0.0, %v10564
  %v10566 = vpop.f32.mrb[0].mxu0
  %10567 = vmatprep.mubr.f32.mxu0 %v9379
  %10568 = vmatmul.mubr.f32.gmra.mrb[0].mxu0 %v8867
  %v10569 = vpop.f32.mrb[0].mxu0
  %v10570 = vadd.f32 0.0, %v10569
  %v10571 = vpop.f32.mrb[0].mxu0
  %10572 = vmatprep.mubr.f32.mxu0 %v9380
  %10573 = vmatmul.mubr.f32.gmra.mrb[0].mxu0 %v8868
  %v10574 = vpop.f32.mrb[0].mxu0
  %v10575 = vadd.f32 0.0, %v10574
  %v10576 = vpop.f32.mrb[0].mxu0
  %10577 = vmatprep.mubr.f32.mxu0 %v9381
  %10578 = vmatmul.mubr.f32.gmra.mrb[0].mxu0 %v8869
  %v10579 = vpop.f32.mrb[0].mxu0
  %v10580 = vadd.f32 0.0, %v10579
  %v10581 = vpop.f32.mrb[0].mxu0
  %10582 = vmatprep.mubr.f32.mxu0 %v9398
  %10583 = vmatmul.mubr.f32.gmra.mrb[0].mxu0 %v8886
  %v10584 = vpop.f32.mrb[0].mxu0
  %v10585 = vadd.f32 0.0, %v10584
  %v10586 = vpop.f32.mrb[0].mxu0
  %10587 = vmatprep.mubr.f32.mxu0 %v9399
  %10588 = vmatmul.mubr.f32.gmra.mrb[0].mxu0 %v8887
  %v10589 = vpop.f32.mrb[0].mxu0
  %v10590 = vadd.f32 0.0, %v10589
  %v10591 = vpop.f32.mrb[0].mxu0
  %10592 = vmatprep.mubr.f32.mxu0 %v9400
  %10593 = vmatmul.mubr.f32.gmra.mrb[0].mxu0 %v8888
  %v10594 = vpop.f32.mrb[0].mxu0
  %v10595 = vadd.f32 0.0, %v10594
  %v10596 = vpop.f32.mrb[0].mxu0
  %10597 = vmatprep.mubr.f32.mxu0 %v9401
  %10598 = vmatmul.mubr.f32.gmra.mrb[0].mxu0 %v8889
  %v10599 = vpop.f32.mrb[0].mxu0
  %v10600 = vadd.f32 0.0, %v10599
  %v10601 = vpop.f32.mrb[0].mxu0
  %10602 = vmatprep.mubr.f32.mxu0 %v9402
  %10603 = vmatmul.mubr.f32.gmra.mrb[0].mxu0 %v8890
  %v10604 = vpop.f32.mrb[0].mxu0
  %v10605 = vadd.f32 0.0, %v10604
  %v10606 = vpop.f32.mrb[0].mxu0
  %10607 = vmatprep.mubr.f32.mxu0 %v9403
  %10608 = vmatmul.mubr.f32.gmra.mrb[0].mxu0 %v8891
  %v10609 = vpop.f32.mrb[0].mxu0
  %v10610 = vadd.f32 0.0, %v10609
  %v10611 = vpop.f32.mrb[0].mxu0
  %10612 = vmatprep.mubr.f32.mxu0 %v9404
  %10613 = vmatmul.mubr.f32.gmra.mrb[0].mxu0 %v8892
  %v10614 = vpop.f32.mrb[0].mxu0
  %v10615 = vadd.f32 0.0, %v10614
  %v10616 = vpop.f32.mrb[0].mxu0
  %10617 = vmatprep.mubr.f32.mxu0 %v9405
  %10618 = vmatmul.mubr.f32.gmra.mrb[0].mxu0 %v8893
  %v10619 = vpop.f32.mrb[0].mxu0
  %v10620 = vadd.f32 0.0, %v10619
  %v10621 = vpop.f32.mrb[0].mxu0
  %10622 = vmatprep.mubr.f32.mxu0 %v9406
  %10623 = vmatmul.mubr.f32.gmra.mrb[0].mxu0 %v8894
  %v10624 = vpop.f32.mrb[0].mxu0
  %v10625 = vadd.f32 0.0, %v10624
  %v10626 = vpop.f32.mrb[0].mxu0
  %10627 = vmatprep.mubr.f32.mxu0 %v9407
  %10628 = vmatmul.mubr.f32.gmra.mrb[0].mxu0 %v8895
  %v10629 = vpop.f32.mrb[0].mxu0
  %v10630 = vadd.f32 0.0, %v10629
  %v10631 = vpop.f32.mrb[0].mxu0
  %10632 = vmatprep.mubr.f32.mxu0 %v9408
  %10633 = vmatmul.mubr.f32.gmra.mrb[0].mxu0 %v8896
  %v10634 = vpop.f32.mrb[0].mxu0
  %v10635 = vadd.f32 0.0, %v10634
  %v10636 = vpop.f32.mrb[0].mxu0
  %10637 = vmatprep.mubr.f32.mxu0 %v9409
  %10638 = vmatmul.mubr.f32.gmra.mrb[0].mxu0 %v8897
  %v10639 = vpop.f32.mrb[0].mxu0
  %v10640 = vadd.f32 0.0, %v10639
  %v10641 = vpop.f32.mrb[0].mxu0
  %10642 = vmatprep.mubr.f32.mxu0 %v9410
  %10643 = vmatmul.mubr.f32.gmra.mrb[0].mxu0 %v8898
  %v10644 = vpop.f32.mrb[0].mxu0
  %v10645 = vadd.f32 0.0, %v10644
  %v10646 = vpop.f32.mrb[0].mxu0
  %10647 = vmatprep.mubr.f32.mxu0 %v9411
  %10648 = vmatmul.mubr.f32.gmra.mrb[0].mxu0 %v8899
  %v10649 = vpop.f32.mrb[0].mxu0
  %v10650 = vadd.f32 0.0, %v10649
  %v10651 = vpop.f32.mrb[0].mxu0
  %10652 = vmatprep.mubr.f32.mxu0 %v9412
  %10653 = vmatmul.mubr.f32.gmra.mrb[0].mxu0 %v8900
  %v10654 = vpop.f32.mrb[0].mxu0
  %v10655 = vadd.f32 0.0, %v10654
  %v10656 = vpop.f32.mrb[0].mxu0
  %10657 = vmatprep.mubr.f32.mxu0 %v9413
  %10658 = vmatmul.mubr.f32.gmra.mrb[0].mxu0 %v8901
  %v10659 = vpop.f32.mrb[0].mxu0
  %v10660 = vadd.f32 0.0, %v10659
  %v10661 = vpop.f32.mrb[0].mxu0
  %10662 = vmatprep.mubr.f32.mxu0 %v9430
  %10663 = vmatmul.mubr.f32.gmra.mrb[0].mxu0 %v8918
  %v10664 = vpop.f32.mrb[0].mxu0
  %v10665 = vadd.f32 0.0, %v10664
  %v10666 = vpop.f32.mrb[0].mxu0
  %10667 = vmatprep.mubr.f32.mxu0 %v9431
  %10668 = vmatmul.mubr.f32.gmra.mrb[0].mxu0 %v8919
  %v10669 = vpop.f32.mrb[0].mxu0
  %v10670 = vadd.f32 0.0, %v10669
  %v10671 = vpop.f32.mrb[0].mxu0
  %10672 = vmatprep.mubr.f32.mxu0 %v9432
  %10673 = vmatmul.mubr.f32.gmra.mrb[0].mxu0 %v8920
  %v10674 = vpop.f32.mrb[0].mxu0
  %v10675 = vadd.f32 0.0, %v10674
  %v10676 = vpop.f32.mrb[0].mxu0
  %10677 = vmatprep.mubr.f32.mxu0 %v9433
  %10678 = vmatmul.mubr.f32.gmra.mrb[0].mxu0 %v8921
  %v10679 = vpop.f32.mrb[0].mxu0
  %v10680 = vadd.f32 0.0, %v10679
  %v10681 = vpop.f32.mrb[0].mxu0
  %10682 = vmatprep.mubr.f32.mxu0 %v9434
  %10683 = vmatmul.mubr.f32.gmra.mrb[0].mxu0 %v8922
  %v10684 = vpop.f32.mrb[0].mxu0
  %v10685 = vadd.f32 0.0, %v10684
  %v10686 = vpop.f32.mrb[0].mxu0
  %10687 = vmatprep.mubr.f32.mxu0 %v9435
  %10688 = vmatmul.mubr.f32.gmra.mrb[0].mxu0 %v8923
  %v10689 = vpop.f32.mrb[0].mxu0
  %v10690 = vadd.f32 0.0, %v10689
  %v10691 = vpop.f32.mrb[0].mxu0
  %10692 = vmatprep.mubr.f32.mxu0 %v9436
  %10693 = vmatmul.mubr.f32.gmra.mrb[0].mxu0 %v8924
  %v10694 = vpop.f32.mrb[0].mxu0
  %v10695 = vadd.f32 0.0, %v10694
  %v10696 = vpop.f32.mrb[0].mxu0
  %10697 = vmatprep.mubr.f32.mxu0 %v9437
  %10698 = vmatmul.mubr.f32.gmra.mrb[0].mxu0 %v8925
  %v10699 = vpop.f32.mrb[0].mxu0
  %v10700 = vadd.f32 0.0, %v10699
  %v10701 = vpop.f32.mrb[0].mxu0
  %10702 = vmatprep.mubr.f32.mxu0 %v9438
  %10703 = vmatmul.mubr.f32.gmra.mrb[0].mxu0 %v8926
  %v10704 = vpop.f32.mrb[0].mxu0
  %v10705 = vadd.f32 0.0, %v10704
  %v10706 = vpop.f32.mrb[0].mxu0
  %10707 = vmatprep.mubr.f32.mxu0 %v9439
  %10708 = vmatmul.mubr.f32.gmra.mrb[0].mxu0 %v8927
  %v10709 = vpop.f32.mrb[0].mxu0
  %v10710 = vadd.f32 0.0, %v10709
  %v10711 = vpop.f32.mrb[0].mxu0
  %10712 = vmatprep.mubr.f32.mxu0 %v9440
  %10713 = vmatmul.mubr.f32.gmra.mrb[0].mxu0 %v8928
  %v10714 = vpop.f32.mrb[0].mxu0
  %v10715 = vadd.f32 0.0, %v10714
  %v10716 = vpop.f32.mrb[0].mxu0
  %10717 = vmatprep.mubr.f32.mxu0 %v9441
  %10718 = vmatmul.mubr.f32.gmra.mrb[0].mxu0 %v8929
  %v10719 = vpop.f32.mrb[0].mxu0
  %v10720 = vadd.f32 0.0, %v10719
  %v10721 = vpop.f32.mrb[0].mxu0
  %10722 = vmatprep.mubr.f32.mxu0 %v9442
  %10723 = vmatmul.mubr.f32.gmra.mrb[0].mxu0 %v8930
  %v10724 = vpop.f32.mrb[0].mxu0
  %v10725 = vadd.f32 0.0, %v10724
  %v10726 = vpop.f32.mrb[0].mxu0
  %10727 = vmatprep.mubr.f32.mxu0 %v9443
  %10728 = vmatmul.mubr.f32.gmra.mrb[0].mxu0 %v8931
  %v10729 = vpop.f32.mrb[0].mxu0
  %v10730 = vadd.f32 0.0, %v10729
  %v10731 = vpop.f32.mrb[0].mxu0
  %10732 = vmatprep.mubr.f32.mxu0 %v9444
  %10733 = vmatmul.mubr.f32.gmra.mrb[0].mxu0 %v8932
  %v10734 = vpop.f32.mrb[0].mxu0
  %v10735 = vadd.f32 0.0, %v10734
  %v10736 = vpop.f32.mrb[0].mxu0
  %10737 = vmatprep.mubr.f32.mxu0 %v9445
  %10738 = vmatmul.mubr.f32.gmra.mrb[0].mxu0 %v8933
  %v10739 = vpop.f32.mrb[0].mxu0
  %v10740 = vadd.f32 0.0, %v10739
  %v10741 = vpop.f32.mrb[0].mxu0
  %10742 = vmatprep.mubr.f32.mxu0 %v9462
  %10743 = vmatmul.mubr.f32.gmra.mrb[0].mxu0 %v8950
  %v10744 = vpop.f32.mrb[0].mxu0
  %v10745 = vadd.f32 0.0, %v10744
  %v10746 = vpop.f32.mrb[0].mxu0
  %10747 = vmatprep.mubr.f32.mxu0 %v9463
  %10748 = vmatmul.mubr.f32.gmra.mrb[0].mxu0 %v8951
  %v10749 = vpop.f32.mrb[0].mxu0
  %v10750 = vadd.f32 0.0, %v10749
  %v10751 = vpop.f32.mrb[0].mxu0
  %10752 = vmatprep.mubr.f32.mxu0 %v9464
  %10753 = vmatmul.mubr.f32.gmra.mrb[0].mxu0 %v8952
  %v10754 = vpop.f32.mrb[0].mxu0
  %v10755 = vadd.f32 0.0, %v10754
  %v10756 = vpop.f32.mrb[0].mxu0
  %10757 = vmatprep.mubr.f32.mxu0 %v9465
  %10758 = vmatmul.mubr.f32.gmra.mrb[0].mxu0 %v8953
  %v10759 = vpop.f32.mrb[0].mxu0
  %v10760 = vadd.f32 0.0, %v10759
  %v10761 = vpop.f32.mrb[0].mxu0
  %10762 = vmatprep.mubr.f32.mxu0 %v9466
  %10763 = vmatmul.mubr.f32.gmra.mrb[0].mxu0 %v8954
  %v10764 = vpop.f32.mrb[0].mxu0
  %v10765 = vadd.f32 0.0, %v10764
  %v10766 = vpop.f32.mrb[0].mxu0
  %10767 = vmatprep.mubr.f32.mxu0 %v9467
  %10768 = vmatmul.mubr.f32.gmra.mrb[0].mxu0 %v8955
  %v10769 = vpop.f32.mrb[0].mxu0
  %v10770 = vadd.f32 0.0, %v10769
  %v10771 = vpop.f32.mrb[0].mxu0
  %10772 = vmatprep.mubr.f32.mxu0 %v9468
  %10773 = vmatmul.mubr.f32.gmra.mrb[0].mxu0 %v8956
  %v10774 = vpop.f32.mrb[0].mxu0
  %v10775 = vadd.f32 0.0, %v10774
  %v10776 = vpop.f32.mrb[0].mxu0
  %10777 = vmatprep.mubr.f32.mxu0 %v9469
  %10778 = vmatmul.mubr.f32.gmra.mrb[0].mxu0 %v8957
  %v10779 = vpop.f32.mrb[0].mxu0
  %v10780 = vadd.f32 0.0, %v10779
  %v10781 = vpop.f32.mrb[0].mxu0
  %10782 = vmatprep.mubr.f32.mxu0 %v9470
  %10783 = vmatmul.mubr.f32.gmra.mrb[0].mxu0 %v8958
  %v10784 = vpop.f32.mrb[0].mxu0
  %v10785 = vadd.f32 0.0, %v10784
  %v10786 = vpop.f32.mrb[0].mxu0
  %10787 = vmatprep.mubr.f32.mxu0 %v9471
  %10788 = vmatmul.mubr.f32.gmra.mrb[0].mxu0 %v8959
  %v10789 = vpop.f32.mrb[0].mxu0
  %v10790 = vadd.f32 0.0, %v10789
  %v10791 = vpop.f32.mrb[0].mxu0
  %10792 = vmatprep.mubr.f32.mxu0 %v9472
  %10793 = vmatmul.mubr.f32.gmra.mrb[0].mxu0 %v8960
  %v10794 = vpop.f32.mrb[0].mxu0
  %v10795 = vadd.f32 0.0, %v10794
  %v10796 = vpop.f32.mrb[0].mxu0
  %10797 = vmatprep.mubr.f32.mxu0 %v9473
  %10798 = vmatmul.mubr.f32.gmra.mrb[0].mxu0 %v8961
  %v10799 = vpop.f32.mrb[0].mxu0
  %v10800 = vadd.f32 0.0, %v10799
  %v10801 = vpop.f32.mrb[0].mxu0
  %10802 = vmatprep.mubr.f32.mxu0 %v9474
  %10803 = vmatmul.mubr.f32.gmra.mrb[0].mxu0 %v8962
  %v10804 = vpop.f32.mrb[0].mxu0
  %v10805 = vadd.f32 0.0, %v10804
  %v10806 = vpop.f32.mrb[0].mxu0
  %10807 = vmatprep.mubr.f32.mxu0 %v9475
  %10808 = vmatmul.mubr.f32.gmra.mrb[0].mxu0 %v8963
  %v10809 = vpop.f32.mrb[0].mxu0
  %v10810 = vadd.f32 0.0, %v10809
  %v10811 = vpop.f32.mrb[0].mxu0
  %10812 = vmatprep.mubr.f32.mxu0 %v9476
  %10813 = vmatmul.mubr.f32.gmra.mrb[0].mxu0 %v8964
  %v10814 = vpop.f32.mrb[0].mxu0
  %v10815 = vadd.f32 0.0, %v10814
  %v10816 = vpop.f32.mrb[0].mxu0
  %10817 = vmatprep.mubr.f32.mxu0 %v9477
  %10818 = vmatmul.mubr.f32.gmra.mrb[0].mxu0 %v8965
  %v10819 = vpop.f32.mrb[0].mxu0
  %v10820 = vadd.f32 0.0, %v10819
  %v10821 = vpop.f32.mrb[0].mxu0
  %10822 = vdwg.mxu0
  %10823 = vst.msk [vmem:[%s4] sm:$0xff] %vm309, %v9545
  %10824 = vst.msk [vmem:[%s4 + $0x8] sm:$0xff] %vm309, %v9550
  %10825 = vst.msk [vmem:[%s4 + $0x10] sm:$0xff] %vm309, %v9555
  %10826 = vst.msk [vmem:[%s4 + $0x18] sm:$0xff] %vm309, %v9560
  %10827 = vst.msk [vmem:[%s4 + $0x20] sm:$0xff] %vm309, %v9565
  %10828 = vst.msk [vmem:[%s4 + $0x28] sm:$0xff] %vm309, %v9570
  %10829 = vst.msk [vmem:[%s4 + $0x30] sm:$0xff] %vm309, %v9575
  %10830 = vst.msk [vmem:[%s4 + $0x38] sm:$0xff] %vm309, %v9580
  %10831 = vst.msk [vmem:[%s4 + $0x40] sm:$0xff] %vm309, %v9585
  %10832 = vst.msk [vmem:[%s4 + $0x48] sm:$0xff] %vm309, %v9590
  %10833 = vst.msk [vmem:[%s4 + $0x50] sm:$0xff] %vm309, %v9595
  %10834 = vst.msk [vmem:[%s4 + $0x58] sm:$0xff] %vm309, %v9600
  %10835 = vst.msk [vmem:[%s4 + $0x60] sm:$0xff] %vm309, %v9605
  %10836 = vst.msk [vmem:[%s4 + $0x68] sm:$0xff] %vm309, %v9610
  %10837 = vst.msk [vmem:[%s4 + $0x70] sm:$0xff] %vm309, %v9615
  %10838 = vst.msk [vmem:[%s4 + $0x78] sm:$0xff] %vm309, %v9620
  %10839 = vst.msk [vmem:[%s4 + $0x80] sm:$0xff] %vm309, %v9625
  %10840 = vst.msk [vmem:[%s4 + $0x88] sm:$0xff] %vm309, %v9630
  %10841 = vst.msk [vmem:[%s4 + $0x90] sm:$0xff] %vm309, %v9635
  %10842 = vst.msk [vmem:[%s4 + $0x98] sm:$0xff] %vm309, %v9640
  %10843 = vst.msk [vmem:[%s4 + $0xa0] sm:$0xff] %vm309, %v9645
  %10844 = vst.msk [vmem:[%s4 + $0xa8] sm:$0xff] %vm309, %v9650
  %10845 = vst.msk [vmem:[%s4 + $0xb0] sm:$0xff] %vm309, %v9655
  %10846 = vst.msk [vmem:[%s4 + $0xb8] sm:$0xff] %vm309, %v9660
  %10847 = vst.msk [vmem:[%s4 + $0xc0] sm:$0xff] %vm309, %v9665
  %10848 = vst.msk [vmem:[%s4 + $0xc8] sm:$0xff] %vm309, %v9670
  %10849 = vst.msk [vmem:[%s4 + $0xd0] sm:$0xff] %vm309, %v9675
  %10850 = vst.msk [vmem:[%s4 + $0xd8] sm:$0xff] %vm309, %v9680
  %10851 = vst.msk [vmem:[%s4 + $0xe0] sm:$0xff] %vm309, %v9685
  %10852 = vst.msk [vmem:[%s4 + $0xe8] sm:$0xff] %vm309, %v9690
  %10853 = vst.msk [vmem:[%s4 + $0xf0] sm:$0xff] %vm309, %v9695
  %10854 = vst.msk [vmem:[%s4 + $0xf8] sm:$0xff] %vm309, %v9700
  %10855 = vst.msk [vmem:[%s4 + $0x100] sm:$0xff] %vm309, %v9705
  %10856 = vst.msk [vmem:[%s4 + $0x108] sm:$0xff] %vm309, %v9710
  %10857 = vst.msk [vmem:[%s4 + $0x110] sm:$0xff] %vm309, %v9715
  %10858 = vst.msk [vmem:[%s4 + $0x118] sm:$0xff] %vm309, %v9720
  %10859 = vst.msk [vmem:[%s4 + $0x120] sm:$0xff] %vm309, %v9725
  %10860 = vst.msk [vmem:[%s4 + $0x128] sm:$0xff] %vm309, %v9730
  %10861 = vst.msk [vmem:[%s4 + $0x130] sm:$0xff] %vm309, %v9735
  %10862 = vst.msk [vmem:[%s4 + $0x138] sm:$0xff] %vm309, %v9740
  %10863 = vst.msk [vmem:[%s4 + $0x140] sm:$0xff] %vm309, %v9745
  %10864 = vst.msk [vmem:[%s4 + $0x148] sm:$0xff] %vm309, %v9750
  %10865 = vst.msk [vmem:[%s4 + $0x150] sm:$0xff] %vm309, %v9755
  %10866 = vst.msk [vmem:[%s4 + $0x158] sm:$0xff] %vm309, %v9760
  %10867 = vst.msk [vmem:[%s4 + $0x160] sm:$0xff] %vm309, %v9765
  %10868 = vst.msk [vmem:[%s4 + $0x168] sm:$0xff] %vm309, %v9770
  %10869 = vst.msk [vmem:[%s4 + $0x170] sm:$0xff] %vm309, %v9775
  %10870 = vst.msk [vmem:[%s4 + $0x178] sm:$0xff] %vm309, %v9780
  %10871 = vst.msk [vmem:[%s4 + $0x180] sm:$0xff] %vm309, %v9785
  %10872 = vst.msk [vmem:[%s4 + $0x188] sm:$0xff] %vm309, %v9790
  %10873 = vst.msk [vmem:[%s4 + $0x190] sm:$0xff] %vm309, %v9795
  %10874 = vst.msk [vmem:[%s4 + $0x198] sm:$0xff] %vm309, %v9800
  %10875 = vst.msk [vmem:[%s4 + $0x1a0] sm:$0xff] %vm309, %v9805
  %10876 = vst.msk [vmem:[%s4 + $0x1a8] sm:$0xff] %vm309, %v9810
  %10877 = vst.msk [vmem:[%s4 + $0x1b0] sm:$0xff] %vm309, %v9815
  %10878 = vst.msk [vmem:[%s4 + $0x1b8] sm:$0xff] %vm309, %v9820
  %10879 = vst.msk [vmem:[%s4 + $0x1c0] sm:$0xff] %vm309, %v9825
  %10880 = vst.msk [vmem:[%s4 + $0x1c8] sm:$0xff] %vm309, %v9830
  %10881 = vst.msk [vmem:[%s4 + $0x1d0] sm:$0xff] %vm309, %v9835
  %10882 = vst.msk [vmem:[%s4 + $0x1d8] sm:$0xff] %vm309, %v9840
  %10883 = vst.msk [vmem:[%s4 + $0x1e0] sm:$0xff] %vm309, %v9845
  %10884 = vst.msk [vmem:[%s4 + $0x1e8] sm:$0xff] %vm309, %v9850
  %10885 = vst.msk [vmem:[%s4 + $0x1f0] sm:$0xff] %vm309, %v9855
  %10886 = vst.msk [vmem:[%s4 + $0x1f8] sm:$0xff] %vm309, %v9860
  %10887 = vst.msk [vmem:[%s4 + $0x200] sm:$0xff] %vm309, %v9865
  %10888 = vst.msk [vmem:[%s4 + $0x208] sm:$0xff] %vm309, %v9870
  %10889 = vst.msk [vmem:[%s4 + $0x210] sm:$0xff] %vm309, %v9875
  %10890 = vst.msk [vmem:[%s4 + $0x218] sm:$0xff] %vm309, %v9880
  %10891 = vst.msk [vmem:[%s4 + $0x220] sm:$0xff] %vm309, %v9885
  %10892 = vst.msk [vmem:[%s4 + $0x228] sm:$0xff] %vm309, %v9890
  %10893 = vst.msk [vmem:[%s4 + $0x230] sm:$0xff] %vm309, %v9895
  %10894 = vst.msk [vmem:[%s4 + $0x238] sm:$0xff] %vm309, %v9900
  %10895 = vst.msk [vmem:[%s4 + $0x240] sm:$0xff] %vm309, %v9905
  %10896 = vst.msk [vmem:[%s4 + $0x248] sm:$0xff] %vm309, %v9910
  %10897 = vst.msk [vmem:[%s4 + $0x250] sm:$0xff] %vm309, %v9915
  %10898 = vst.msk [vmem:[%s4 + $0x258] sm:$0xff] %vm309, %v9920
  %10899 = vst.msk [vmem:[%s4 + $0x260] sm:$0xff] %vm309, %v9925
  %10900 = vst.msk [vmem:[%s4 + $0x268] sm:$0xff] %vm309, %v9930
  %10901 = vst.msk [vmem:[%s4 + $0x270] sm:$0xff] %vm309, %v9935
  %10902 = vst.msk [vmem:[%s4 + $0x278] sm:$0xff] %vm309, %v9940
  %10903 = vst.msk [vmem:[%s4 + $0x280] sm:$0xff] %vm309, %v9945
  %10904 = vst.msk [vmem:[%s4 + $0x288] sm:$0xff] %vm309, %v9950
  %10905 = vst.msk [vmem:[%s4 + $0x290] sm:$0xff] %vm309, %v9955
  %10906 = vst.msk [vmem:[%s4 + $0x298] sm:$0xff] %vm309, %v9960
  %10907 = vst.msk [vmem:[%s4 + $0x2a0] sm:$0xff] %vm309, %v9965
  %10908 = vst.msk [vmem:[%s4 + $0x2a8] sm:$0xff] %vm309, %v9970
  %10909 = vst.msk [vmem:[%s4 + $0x2b0] sm:$0xff] %vm309, %v9975
  %10910 = vst.msk [vmem:[%s4 + $0x2b8] sm:$0xff] %vm309, %v9980
  %10911 = vst.msk [vmem:[%s4 + $0x2c0] sm:$0xff] %vm309, %v9985
  %10912 = vst.msk [vmem:[%s4 + $0x2c8] sm:$0xff] %vm309, %v9990
  %10913 = vst.msk [vmem:[%s4 + $0x2d0] sm:$0xff] %vm309, %v9995
  %10914 = vst.msk [vmem:[%s4 + $0x2d8] sm:$0xff] %vm309, %v10000
  %10915 = vst.msk [vmem:[%s4 + $0x2e0] sm:$0xff] %vm309, %v10005
  %10916 = vst.msk [vmem:[%s4 + $0x2e8] sm:$0xff] %vm309, %v10010
  %10917 = vst.msk [vmem:[%s4 + $0x2f0] sm:$0xff] %vm309, %v10015
  %10918 = vst.msk [vmem:[%s4 + $0x2f8] sm:$0xff] %vm309, %v10020
  %10919 = vst.msk [vmem:[%s4 + $0x300] sm:$0xff] %vm309, %v10025
  %10920 = vst.msk [vmem:[%s4 + $0x308] sm:$0xff] %vm309, %v10030
  %10921 = vst.msk [vmem:[%s4 + $0x310] sm:$0xff] %vm309, %v10035
  %10922 = vst.msk [vmem:[%s4 + $0x318] sm:$0xff] %vm309, %v10040
  %10923 = vst.msk [vmem:[%s4 + $0x320] sm:$0xff] %vm309, %v10045
  %10924 = vst.msk [vmem:[%s4 + $0x328] sm:$0xff] %vm309, %v10050
  %10925 = vst.msk [vmem:[%s4 + $0x330] sm:$0xff] %vm309, %v10055
  %10926 = vst.msk [vmem:[%s4 + $0x338] sm:$0xff] %vm309, %v10060
  %10927 = vst.msk [vmem:[%s4 + $0x340] sm:$0xff] %vm309, %v10065
  %10928 = vst.msk [vmem:[%s4 + $0x348] sm:$0xff] %vm309, %v10070
  %10929 = vst.msk [vmem:[%s4 + $0x350] sm:$0xff] %vm309, %v10075
  %10930 = vst.msk [vmem:[%s4 + $0x358] sm:$0xff] %vm309, %v10080
  %10931 = vst.msk [vmem:[%s4 + $0x360] sm:$0xff] %vm309, %v10085
  %10932 = vst.msk [vmem:[%s4 + $0x368] sm:$0xff] %vm309, %v10090
  %10933 = vst.msk [vmem:[%s4 + $0x370] sm:$0xff] %vm309, %v10095
  %10934 = vst.msk [vmem:[%s4 + $0x378] sm:$0xff] %vm309, %v10100
  %10935 = vst.msk [vmem:[%s4 + $0x380] sm:$0xff] %vm309, %v10105
  %10936 = vst.msk [vmem:[%s4 + $0x388] sm:$0xff] %vm309, %v10110
  %10937 = vst.msk [vmem:[%s4 + $0x390] sm:$0xff] %vm309, %v10115
  %10938 = vst.msk [vmem:[%s4 + $0x398] sm:$0xff] %vm309, %v10120
  %10939 = vst.msk [vmem:[%s4 + $0x3a0] sm:$0xff] %vm309, %v10125
  %10940 = vst.msk [vmem:[%s4 + $0x3a8] sm:$0xff] %vm309, %v10130
  %10941 = vst.msk [vmem:[%s4 + $0x3b0] sm:$0xff] %vm309, %v10135
  %10942 = vst.msk [vmem:[%s4 + $0x3b8] sm:$0xff] %vm309, %v10140
  %10943 = vst.msk [vmem:[%s4 + $0x3c0] sm:$0xff] %vm309, %v10145
  %10944 = vst.msk [vmem:[%s4 + $0x3c8] sm:$0xff] %vm309, %v10150
  %10945 = vst.msk [vmem:[%s4 + $0x3d0] sm:$0xff] %vm309, %v10155
  %10946 = vst.msk [vmem:[%s4 + $0x3d8] sm:$0xff] %vm309, %v10160
  %10947 = vst.msk [vmem:[%s4 + $0x3e0] sm:$0xff] %vm309, %v10165
  %10948 = vst.msk [vmem:[%s4 + $0x3e8] sm:$0xff] %vm309, %v10170
  %10949 = vst.msk [vmem:[%s4 + $0x3f0] sm:$0xff] %vm309, %v10175
  %10950 = vst.msk [vmem:[%s4 + $0x3f8] sm:$0xff] %vm309, %v10180
  %10951 = vst.msk [vmem:[%s4 + $0x400] sm:$0xff] %vm309, %v10185
  %10952 = vst.msk [vmem:[%s4 + $0x408] sm:$0xff] %vm309, %v10190
  %10953 = vst.msk [vmem:[%s4 + $0x410] sm:$0xff] %vm309, %v10195
  %10954 = vst.msk [vmem:[%s4 + $0x418] sm:$0xff] %vm309, %v10200
  %10955 = vst.msk [vmem:[%s4 + $0x420] sm:$0xff] %vm309, %v10205
  %10956 = vst.msk [vmem:[%s4 + $0x428] sm:$0xff] %vm309, %v10210
  %10957 = vst.msk [vmem:[%s4 + $0x430] sm:$0xff] %vm309, %v10215
  %10958 = vst.msk [vmem:[%s4 + $0x438] sm:$0xff] %vm309, %v10220
  %10959 = vst.msk [vmem:[%s4 + $0x440] sm:$0xff] %vm309, %v10225
  %10960 = vst.msk [vmem:[%s4 + $0x448] sm:$0xff] %vm309, %v10230
  %10961 = vst.msk [vmem:[%s4 + $0x450] sm:$0xff] %vm309, %v10235
  %10962 = vst.msk [vmem:[%s4 + $0x458] sm:$0xff] %vm309, %v10240
  %10963 = vst.msk [vmem:[%s4 + $0x460] sm:$0xff] %vm309, %v10245
  %10964 = vst.msk [vmem:[%s4 + $0x468] sm:$0xff] %vm309, %v10250
  %10965 = vst.msk [vmem:[%s4 + $0x470] sm:$0xff] %vm309, %v10255
  %10966 = vst.msk [vmem:[%s4 + $0x478] sm:$0xff] %vm309, %v10260
  %10967 = vst.msk [vmem:[%s4 + $0x480] sm:$0xff] %vm309, %v10265
  %10968 = vst.msk [vmem:[%s4 + $0x488] sm:$0xff] %vm309, %v10270
  %10969 = vst.msk [vmem:[%s4 + $0x490] sm:$0xff] %vm309, %v10275
  %10970 = vst.msk [vmem:[%s4 + $0x498] sm:$0xff] %vm309, %v10280
  %10971 = vst.msk [vmem:[%s4 + $0x4a0] sm:$0xff] %vm309, %v10285
  %10972 = vst.msk [vmem:[%s4 + $0x4a8] sm:$0xff] %vm309, %v10290
  %10973 = vst.msk [vmem:[%s4 + $0x4b0] sm:$0xff] %vm309, %v10295
  %10974 = vst.msk [vmem:[%s4 + $0x4b8] sm:$0xff] %vm309, %v10300
  %10975 = vst.msk [vmem:[%s4 + $0x4c0] sm:$0xff] %vm309, %v10305
  %10976 = vst.msk [vmem:[%s4 + $0x4c8] sm:$0xff] %vm309, %v10310
  %10977 = vst.msk [vmem:[%s4 + $0x4d0] sm:$0xff] %vm309, %v10315
  %10978 = vst.msk [vmem:[%s4 + $0x4d8] sm:$0xff] %vm309, %v10320
  %10979 = vst.msk [vmem:[%s4 + $0x4e0] sm:$0xff] %vm309, %v10325
  %10980 = vst.msk [vmem:[%s4 + $0x4e8] sm:$0xff] %vm309, %v10330
  %10981 = vst.msk [vmem:[%s4 + $0x4f0] sm:$0xff] %vm309, %v10335
  %10982 = vst.msk [vmem:[%s4 + $0x4f8] sm:$0xff] %vm309, %v10340
  %10983 = vst.msk [vmem:[%s4 + $0x500] sm:$0xff] %vm309, %v10345
  %10984 = vst.msk [vmem:[%s4 + $0x508] sm:$0xff] %vm309, %v10350
  %10985 = vst.msk [vmem:[%s4 + $0x510] sm:$0xff] %vm309, %v10355
  %10986 = vst.msk [vmem:[%s4 + $0x518] sm:$0xff] %vm309, %v10360
  %10987 = vst.msk [vmem:[%s4 + $0x520] sm:$0xff] %vm309, %v10365
  %10988 = vst.msk [vmem:[%s4 + $0x528] sm:$0xff] %vm309, %v10370
  %10989 = vst.msk [vmem:[%s4 + $0x530] sm:$0xff] %vm309, %v10375
  %10990 = vst.msk [vmem:[%s4 + $0x538] sm:$0xff] %vm309, %v10380
  %10991 = vst.msk [vmem:[%s4 + $0x540] sm:$0xff] %vm309, %v10385
  %10992 = vst.msk [vmem:[%s4 + $0x548] sm:$0xff] %vm309, %v10390
  %10993 = vst.msk [vmem:[%s4 + $0x550] sm:$0xff] %vm309, %v10395
  %10994 = vst.msk [vmem:[%s4 + $0x558] sm:$0xff] %vm309, %v10400
  %10995 = vst.msk [vmem:[%s4 + $0x560] sm:$0xff] %vm309, %v10405
  %10996 = vst.msk [vmem:[%s4 + $0x568] sm:$0xff] %vm309, %v10410
  %10997 = vst.msk [vmem:[%s4 + $0x570] sm:$0xff] %vm309, %v10415
  %10998 = vst.msk [vmem:[%s4 + $0x578] sm:$0xff] %vm309, %v10420
  %10999 = vst.msk [vmem:[%s4 + $0x580] sm:$0xff] %vm309, %v10425
  %11000 = vst.msk [vmem:[%s4 + $0x588] sm:$0xff] %vm309, %v10430
  %11001 = vst.msk [vmem:[%s4 + $0x590] sm:$0xff] %vm309, %v10435
  %11002 = vst.msk [vmem:[%s4 + $0x598] sm:$0xff] %vm309, %v10440
  %11003 = vst.msk [vmem:[%s4 + $0x5a0] sm:$0xff] %vm309, %v10445
  %11004 = vst.msk [vmem:[%s4 + $0x5a8] sm:$0xff] %vm309, %v10450
  %11005 = vst.msk [vmem:[%s4 + $0x5b0] sm:$0xff] %vm309, %v10455
  %11006 = vst.msk [vmem:[%s4 + $0x5b8] sm:$0xff] %vm309, %v10460
  %11007 = vst.msk [vmem:[%s4 + $0x5c0] sm:$0xff] %vm309, %v10465
  %11008 = vst.msk [vmem:[%s4 + $0x5c8] sm:$0xff] %vm309, %v10470
  %11009 = vst.msk [vmem:[%s4 + $0x5d0] sm:$0xff] %vm309, %v10475
  %11010 = vst.msk [vmem:[%s4 + $0x5d8] sm:$0xff] %vm309, %v10480
  %11011 = vst.msk [vmem:[%s4 + $0x5e0] sm:$0xff] %vm309, %v10485
  %11012 = vst.msk [vmem:[%s4 + $0x5e8] sm:$0xff] %vm309, %v10490
  %11013 = vst.msk [vmem:[%s4 + $0x5f0] sm:$0xff] %vm309, %v10495
  %11014 = vst.msk [vmem:[%s4 + $0x5f8] sm:$0xff] %vm309, %v10500
  %11015 = vst.msk [vmem:[%s4 + $0x600] sm:$0xff] %vm309, %v10505
  %11016 = vst.msk [vmem:[%s4 + $0x608] sm:$0xff] %vm309, %v10510
  %11017 = vst.msk [vmem:[%s4 + $0x610] sm:$0xff] %vm309, %v10515
  %11018 = vst.msk [vmem:[%s4 + $0x618] sm:$0xff] %vm309, %v10520
  %11019 = vst.msk [vmem:[%s4 + $0x620] sm:$0xff] %vm309, %v10525
  %11020 = vst.msk [vmem:[%s4 + $0x628] sm:$0xff] %vm309, %v10530
  %11021 = vst.msk [vmem:[%s4 + $0x630] sm:$0xff] %vm309, %v10535
  %11022 = vst.msk [vmem:[%s4 + $0x638] sm:$0xff] %vm309, %v10540
  %11023 = vst.msk [vmem:[%s4 + $0x640] sm:$0xff] %vm309, %v10545
  %11024 = vst.msk [vmem:[%s4 + $0x648] sm:$0xff] %vm309, %v10550
  %11025 = vst.msk [vmem:[%s4 + $0x650] sm:$0xff] %vm309, %v10555
  %11026 = vst.msk [vmem:[%s4 + $0x658] sm:$0xff] %vm309, %v10560
  %11027 = vst.msk [vmem:[%s4 + $0x660] sm:$0xff] %vm309, %v10565
  %11028 = vst.msk [vmem:[%s4 + $0x668] sm:$0xff] %vm309, %v10570
  %11029 = vst.msk [vmem:[%s4 + $0x670] sm:$0xff] %vm309, %v10575
  %11030 = vst.msk [vmem:[%s4 + $0x678] sm:$0xff] %vm309, %v10580
  %11031 = vst.msk [vmem:[%s4 + $0x680] sm:$0xff] %vm309, %v10585
  %11032 = vst.msk [vmem:[%s4 + $0x688] sm:$0xff] %vm309, %v10590
  %11033 = vst.msk [vmem:[%s4 + $0x690] sm:$0xff] %vm309, %v10595
  %11034 = vst.msk [vmem:[%s4 + $0x698] sm:$0xff] %vm309, %v10600
  %11035 = vst.msk [vmem:[%s4 + $0x6a0] sm:$0xff] %vm309, %v10605
  %11036 = vst.msk [vmem:[%s4 + $0x6a8] sm:$0xff] %vm309, %v10610
  %11037 = vst.msk [vmem:[%s4 + $0x6b0] sm:$0xff] %vm309, %v10615
  %11038 = vst.msk [vmem:[%s4 + $0x6b8] sm:$0xff] %vm309, %v10620
  %11039 = vst.msk [vmem:[%s4 + $0x6c0] sm:$0xff] %vm309, %v10625
  %11040 = vst.msk [vmem:[%s4 + $0x6c8] sm:$0xff] %vm309, %v10630
  %11041 = vst.msk [vmem:[%s4 + $0x6d0] sm:$0xff] %vm309, %v10635
  %11042 = vst.msk [vmem:[%s4 + $0x6d8] sm:$0xff] %vm309, %v10640
  %11043 = vst.msk [vmem:[%s4 + $0x6e0] sm:$0xff] %vm309, %v10645
  %11044 = vst.msk [vmem:[%s4 + $0x6e8] sm:$0xff] %vm309, %v10650
  %11045 = vst.msk [vmem:[%s4 + $0x6f0] sm:$0xff] %vm309, %v10655
  %11046 = vst.msk [vmem:[%s4 + $0x6f8] sm:$0xff] %vm309, %v10660
  %11047 = vst.msk [vmem:[%s4 + $0x700] sm:$0xff] %vm309, %v10665
  %11048 = vst.msk [vmem:[%s4 + $0x708] sm:$0xff] %vm309, %v10670
  %11049 = vst.msk [vmem:[%s4 + $0x710] sm:$0xff] %vm309, %v10675
  %11050 = vst.msk [vmem:[%s4 + $0x718] sm:$0xff] %vm309, %v10680
  %11051 = vst.msk [vmem:[%s4 + $0x720] sm:$0xff] %vm309, %v10685
  %11052 = vst.msk [vmem:[%s4 + $0x728] sm:$0xff] %vm309, %v10690
  %11053 = vst.msk [vmem:[%s4 + $0x730] sm:$0xff] %vm309, %v10695
  %11054 = vst.msk [vmem:[%s4 + $0x738] sm:$0xff] %vm309, %v10700
  %11055 = vst.msk [vmem:[%s4 + $0x740] sm:$0xff] %vm309, %v10705
  %11056 = vst.msk [vmem:[%s4 + $0x748] sm:$0xff] %vm309, %v10710
  %11057 = vst.msk [vmem:[%s4 + $0x750] sm:$0xff] %vm309, %v10715
  %11058 = vst.msk [vmem:[%s4 + $0x758] sm:$0xff] %vm309, %v10720
  %11059 = vst.msk [vmem:[%s4 + $0x760] sm:$0xff] %vm309, %v10725
  %11060 = vst.msk [vmem:[%s4 + $0x768] sm:$0xff] %vm309, %v10730
  %11061 = vst.msk [vmem:[%s4 + $0x770] sm:$0xff] %vm309, %v10735
  %11062 = vst.msk [vmem:[%s4 + $0x778] sm:$0xff] %vm309, %v10740
  %11063 = vst.msk [vmem:[%s4 + $0x780] sm:$0xff] %vm309, %v10745
  %11064 = vst.msk [vmem:[%s4 + $0x788] sm:$0xff] %vm309, %v10750
  %11065 = vst.msk [vmem:[%s4 + $0x790] sm:$0xff] %vm309, %v10755
  %11066 = vst.msk [vmem:[%s4 + $0x798] sm:$0xff] %vm309, %v10760
  %11067 = vst.msk [vmem:[%s4 + $0x7a0] sm:$0xff] %vm309, %v10765
  %11068 = vst.msk [vmem:[%s4 + $0x7a8] sm:$0xff] %vm309, %v10770
  %11069 = vst.msk [vmem:[%s4 + $0x7b0] sm:$0xff] %vm309, %v10775
  %11070 = vst.msk [vmem:[%s4 + $0x7b8] sm:$0xff] %vm309, %v10780
  %11071 = vst.msk [vmem:[%s4 + $0x7c0] sm:$0xff] %vm309, %v10785
  %11072 = vst.msk [vmem:[%s4 + $0x7c8] sm:$0xff] %vm309, %v10790
  %11073 = vst.msk [vmem:[%s4 + $0x7d0] sm:$0xff] %vm309, %v10795
  %11074 = vst.msk [vmem:[%s4 + $0x7d8] sm:$0xff] %vm309, %v10800
  %11075 = vst.msk [vmem:[%s4 + $0x7e0] sm:$0xff] %vm309, %v10805
  %11076 = vst.msk [vmem:[%s4 + $0x7e8] sm:$0xff] %vm309, %v10810
  %11077 = vst.msk [vmem:[%s4 + $0x7f0] sm:$0xff] %vm309, %v10815
  %11078 = vst.msk [vmem:[%s4 + $0x7f8] sm:$0xff] %vm309, %v10820
  %11079 = vmatprep.subr.mxu0 %v7911
  %11080 = vmatpush1.xpose.msra.mxu0 %v7910
  %11081 = vmatprep.subr.mxu0 %v7927
  %11082 = vmatpush1.xpose.msra.mxu0 %v7926
  %11083 = vmatprep.subr.mxu0 %v7943
  %11084 = vmatpush1.xpose.msra.mxu0 %v7942
  %11085 = vmatprep.subr.mxu0 %v7959
  %11086 = vmatpush1.xpose.msra.mxu0 %v7958
  %11087 = vmatprep.subr.mxu0 %v7975
  %11088 = vmatpush1.xpose.msra.mxu0 %v7974
  %11089 = vmatprep.subr.mxu0 %v7991
  %11090 = vmatpush1.xpose.msra.mxu0 %v7990
  %11091 = vmatprep.subr.mxu0 %v8007
  %11092 = vmatpush1.xpose.msra.mxu0 %v8006
  %11093 = vmatprep.subr.mxu0 %v8023
  %11094 = vmatpush1.xpose.msra.mxu0 %v8022
  %11095 = vmatprep.subr.mxu0 %v8039
  %11096 = vmatpush1.xpose.msra.mxu0 %v8038
  %11097 = vmatprep.subr.mxu0 %v8055
  %11098 = vmatpush1.xpose.msra.mxu0 %v8054
  %11099 = vmatprep.subr.mxu0 %v8071
  %11100 = vmatpush1.xpose.msra.mxu0 %v8070
  %11101 = vmatprep.subr.mxu0 %v8087
  %11102 = vmatpush1.xpose.msra.mxu0 %v8086
  %11103 = vmatprep.subr.mxu0 %v8103
  %11104 = vmatpush1.xpose.msra.mxu0 %v8102
  %11105 = vmatprep.subr.mxu0 %v8119
  %11106 = vmatpush1.xpose.msra.mxu0 %v8118
  %11107 = vmatprep.subr.mxu0 %v8135
  %11108 = vmatpush1.xpose.msra.mxu0 %v8134
  %11109 = vmatprep.subr.mxu0 %v8151
  %11110 = vmatpush1.xpose.msra.mxu0 %v8150
  %11111 = vmatprep.subr.mxu0 %v8167
  %11112 = vmatpush1.xpose.msra.mxu0 %v8166
  %11113 = vmatprep.subr.mxu0 %v8183
  %11114 = vmatpush1.xpose.msra.mxu0 %v8182
  %11115 = vmatprep.subr.mxu0 %v8199
  %11116 = vmatpush1.xpose.msra.mxu0 %v8198
  %11117 = vmatprep.subr.mxu0 %v8215
  %11118 = vmatpush1.xpose.msra.mxu0 %v8214
  %11119 = vmatprep.subr.mxu0 %v8231
  %11120 = vmatpush1.xpose.msra.mxu0 %v8230
  %11121 = vmatprep.subr.mxu0 %v8247
  %11122 = vmatpush1.xpose.msra.mxu0 %v8246
  %11123 = vmatprep.subr.mxu0 %v8263
  %11124 = vmatpush1.xpose.msra.mxu0 %v8262
  %11125 = vmatprep.subr.mxu0 %v8279
  %11126 = vmatpush1.xpose.msra.mxu0 %v8278
  %11127 = vmatprep.subr.mxu0 %v8295
  %11128 = vmatpush1.xpose.msra.mxu0 %v8294
  %11129 = vmatprep.subr.mxu0 %v8311
  %11130 = vmatpush1.xpose.msra.mxu0 %v8310
  %11131 = vmatprep.subr.mxu0 %v8327
  %11132 = vmatpush1.xpose.msra.mxu0 %v8326
  %11133 = vmatprep.subr.mxu0 %v8343
  %11134 = vmatpush1.xpose.msra.mxu0 %v8342
  %11135 = vmatprep.subr.mxu0 %v8359
  %11136 = vmatpush1.xpose.msra.mxu0 %v8358
  %11137 = vmatprep.subr.mxu0 %v8375
  %11138 = vmatpush1.xpose.msra.mxu0 %v8374
  %11139 = vmatprep.subr.mxu0 %v8391
  %11140 = vmatpush1.xpose.msra.mxu0 %v8390
  %11141 = vmatprep.subr.mxu0 %v8407
  %11142 = vmatpush1.xpose.msra.mxu0 %v8406
  %11143 = vmatprep.mubr.f32.mxu0 1.0
  %11144 = vmatmul.mubr.f32.gmra.mrb[0].mxu0 1.0
  %v11145 = vpop.f32.mrb[0].mxu0
  %v11146 = vadd.f32 0.0, %v11145
  %v11147 = vpop.f32.mrb[0].mxu0
  %v11148 = vadd.f32 0.0, %v11147
  %11149 = vdwg.mxu0
  %11150 = vmatprep.subr.mxu0 %v7913
  %11151 = vmatpush1.xpose.msra.mxu0 %v7912
  %11152 = vmatprep.subr.mxu0 %v7929
  %11153 = vmatpush1.xpose.msra.mxu0 %v7928
  %11154 = vmatprep.subr.mxu0 %v7945
  %11155 = vmatpush1.xpose.msra.mxu0 %v7944
  %11156 = vmatprep.subr.mxu0 %v7961
  %11157 = vmatpush1.xpose.msra.mxu0 %v7960
  %11158 = vmatprep.subr.mxu0 %v7977
  %11159 = vmatpush1.xpose.msra.mxu0 %v7976
  %11160 = vmatprep.subr.mxu0 %v7993
  %11161 = vmatpush1.xpose.msra.mxu0 %v7992
  %11162 = vmatprep.subr.mxu0 %v8009
  %11163 = vmatpush1.xpose.msra.mxu0 %v8008
  %11164 = vmatprep.subr.mxu0 %v8025
  %11165 = vmatpush1.xpose.msra.mxu0 %v8024
  %11166 = vmatprep.subr.mxu0 %v8041
  %11167 = vmatpush1.xpose.msra.mxu0 %v8040
  %11168 = vmatprep.subr.mxu0 %v8057
  %11169 = vmatpush1.xpose.msra.mxu0 %v8056
  %11170 = vmatprep.subr.mxu0 %v8073
  %11171 = vmatpush1.xpose.msra.mxu0 %v8072
  %11172 = vmatprep.subr.mxu0 %v8089
  %11173 = vmatpush1.xpose.msra.mxu0 %v8088
  %11174 = vmatprep.subr.mxu0 %v8105
  %11175 = vmatpush1.xpose.msra.mxu0 %v8104
  %11176 = vmatprep.subr.mxu0 %v8121
  %11177 = vmatpush1.xpose.msra.mxu0 %v8120
  %11178 = vmatprep.subr.mxu0 %v8137
  %11179 = vmatpush1.xpose.msra.mxu0 %v8136
  %11180 = vmatprep.subr.mxu0 %v8153
  %11181 = vmatpush1.xpose.msra.mxu0 %v8152
  %11182 = vmatprep.subr.mxu0 %v8169
  %11183 = vmatpush1.xpose.msra.mxu0 %v8168
  %11184 = vmatprep.subr.mxu0 %v8185
  %11185 = vmatpush1.xpose.msra.mxu0 %v8184
  %11186 = vmatprep.subr.mxu0 %v8201
  %11187 = vmatpush1.xpose.msra.mxu0 %v8200
  %11188 = vmatprep.subr.mxu0 %v8217
  %11189 = vmatpush1.xpose.msra.mxu0 %v8216
  %11190 = vmatprep.subr.mxu0 %v8233
  %11191 = vmatpush1.xpose.msra.mxu0 %v8232
  %11192 = vmatprep.subr.mxu0 %v8249
  %11193 = vmatpush1.xpose.msra.mxu0 %v8248
  %11194 = vmatprep.subr.mxu0 %v8265
  %11195 = vmatpush1.xpose.msra.mxu0 %v8264
  %11196 = vmatprep.subr.mxu0 %v8281
  %11197 = vmatpush1.xpose.msra.mxu0 %v8280
  %11198 = vmatprep.subr.mxu0 %v8297
  %11199 = vmatpush1.xpose.msra.mxu0 %v8296
  %11200 = vmatprep.subr.mxu0 %v8313
  %11201 = vmatpush1.xpose.msra.mxu0 %v8312
  %11202 = vmatprep.subr.mxu0 %v8329
  %11203 = vmatpush1.xpose.msra.mxu0 %v8328
  %11204 = vmatprep.subr.mxu0 %v8345
  %11205 = vmatpush1.xpose.msra.mxu0 %v8344
  %11206 = vmatprep.subr.mxu0 %v8361
  %11207 = vmatpush1.xpose.msra.mxu0 %v8360
  %11208 = vmatprep.subr.mxu0 %v8377
  %11209 = vmatpush1.xpose.msra.mxu0 %v8376
  %11210 = vmatprep.subr.mxu0 %v8393
  %11211 = vmatpush1.xpose.msra.mxu0 %v8392
  %11212 = vmatprep.subr.mxu0 %v8409
  %11213 = vmatpush1.xpose.msra.mxu0 %v8408
  %11214 = vmatprep.mubr.f32.mxu0 1.0
  %11215 = vmatmul.mubr.f32.gmra.mrb[0].mxu0 1.0
  %v11216 = vpop.f32.mrb[0].mxu0
  %v11217 = vadd.f32 %v11146, %v11216
  %v11218 = vpop.f32.mrb[0].mxu0
  %v11219 = vadd.f32 %v11148, %v11218
  %11220 = vdwg.mxu0
  %11221 = vmatprep.subr.mxu0 %v7915
  %11222 = vmatpush1.xpose.msra.mxu0 %v7914
  %11223 = vmatprep.subr.mxu0 %v7931
  %11224 = vmatpush1.xpose.msra.mxu0 %v7930
  %11225 = vmatprep.subr.mxu0 %v7947
  %11226 = vmatpush1.xpose.msra.mxu0 %v7946
  %11227 = vmatprep.subr.mxu0 %v7963
  %11228 = vmatpush1.xpose.msra.mxu0 %v7962
  %11229 = vmatprep.subr.mxu0 %v7979
  %11230 = vmatpush1.xpose.msra.mxu0 %v7978
  %11231 = vmatprep.subr.mxu0 %v7995
  %11232 = vmatpush1.xpose.msra.mxu0 %v7994
  %11233 = vmatprep.subr.mxu0 %v8011
  %11234 = vmatpush1.xpose.msra.mxu0 %v8010
  %11235 = vmatprep.subr.mxu0 %v8027
  %11236 = vmatpush1.xpose.msra.mxu0 %v8026
  %11237 = vmatprep.subr.mxu0 %v8043
  %11238 = vmatpush1.xpose.msra.mxu0 %v8042
  %11239 = vmatprep.subr.mxu0 %v8059
  %11240 = vmatpush1.xpose.msra.mxu0 %v8058
  %11241 = vmatprep.subr.mxu0 %v8075
  %11242 = vmatpush1.xpose.msra.mxu0 %v8074
  %11243 = vmatprep.subr.mxu0 %v8091
  %11244 = vmatpush1.xpose.msra.mxu0 %v8090
  %11245 = vmatprep.subr.mxu0 %v8107
  %11246 = vmatpush1.xpose.msra.mxu0 %v8106
  %11247 = vmatprep.subr.mxu0 %v8123
  %11248 = vmatpush1.xpose.msra.mxu0 %v8122
  %11249 = vmatprep.subr.mxu0 %v8139
  %11250 = vmatpush1.xpose.msra.mxu0 %v8138
  %11251 = vmatprep.subr.mxu0 %v8155
  %11252 = vmatpush1.xpose.msra.mxu0 %v8154
  %11253 = vmatprep.subr.mxu0 %v8171
  %11254 = vmatpush1.xpose.msra.mxu0 %v8170
  %11255 = vmatprep.subr.mxu0 %v8187
  %11256 = vmatpush1.xpose.msra.mxu0 %v8186
  %11257 = vmatprep.subr.mxu0 %v8203
  %11258 = vmatpush1.xpose.msra.mxu0 %v8202
  %11259 = vmatprep.subr.mxu0 %v8219
  %11260 = vmatpush1.xpose.msra.mxu0 %v8218
  %11261 = vmatprep.subr.mxu0 %v8235
  %11262 = vmatpush1.xpose.msra.mxu0 %v8234
  %11263 = vmatprep.subr.mxu0 %v8251
  %11264 = vmatpush1.xpose.msra.mxu0 %v8250
  %11265 = vmatprep.subr.mxu0 %v8267
  %11266 = vmatpush1.xpose.msra.mxu0 %v8266
  %11267 = vmatprep.subr.mxu0 %v8283
  %11268 = vmatpush1.xpose.msra.mxu0 %v8282
  %11269 = vmatprep.subr.mxu0 %v8299
  %11270 = vmatpush1.xpose.msra.mxu0 %v8298
  %11271 = vmatprep.subr.mxu0 %v8315
  %11272 = vmatpush1.xpose.msra.mxu0 %v8314
  %11273 = vmatprep.subr.mxu0 %v8331
  %11274 = vmatpush1.xpose.msra.mxu0 %v8330
  %11275 = vmatprep.subr.mxu0 %v8347
  %11276 = vmatpush1.xpose.msra.mxu0 %v8346
  %11277 = vmatprep.subr.mxu0 %v8363
  %11278 = vmatpush1.xpose.msra.mxu0 %v8362
  %11279 = vmatprep.subr.mxu0 %v8379
  %11280 = vmatpush1.xpose.msra.mxu0 %v8378
  %11281 = vmatprep.subr.mxu0 %v8395
  %11282 = vmatpush1.xpose.msra.mxu0 %v8394
  %11283 = vmatprep.subr.mxu0 %v8411
  %11284 = vmatpush1.xpose.msra.mxu0 %v8410
  %11285 = vmatprep.mubr.f32.mxu0 1.0
  %11286 = vmatmul.mubr.f32.gmra.mrb[0].mxu0 1.0
  %v11287 = vpop.f32.mrb[0].mxu0
  %v11288 = vadd.f32 %v11217, %v11287
  %v11289 = vpop.f32.mrb[0].mxu0
  %v11290 = vadd.f32 %v11219, %v11289
  %11291 = vdwg.mxu0
  %11292 = vmatprep.subr.mxu0 %v7917
  %11293 = vmatpush1.xpose.msra.mxu0 %v7916
  %11294 = vmatprep.subr.mxu0 %v7933
  %11295 = vmatpush1.xpose.msra.mxu0 %v7932
  %11296 = vmatprep.subr.mxu0 %v7949
  %11297 = vmatpush1.xpose.msra.mxu0 %v7948
  %11298 = vmatprep.subr.mxu0 %v7965
  %11299 = vmatpush1.xpose.msra.mxu0 %v7964
  %11300 = vmatprep.subr.mxu0 %v7981
  %11301 = vmatpush1.xpose.msra.mxu0 %v7980
  %11302 = vmatprep.subr.mxu0 %v7997
  %11303 = vmatpush1.xpose.msra.mxu0 %v7996
  %11304 = vmatprep.subr.mxu0 %v8013
  %11305 = vmatpush1.xpose.msra.mxu0 %v8012
  %11306 = vmatprep.subr.mxu0 %v8029
  %11307 = vmatpush1.xpose.msra.mxu0 %v8028
  %11308 = vmatprep.subr.mxu0 %v8045
  %11309 = vmatpush1.xpose.msra.mxu0 %v8044
  %11310 = vmatprep.subr.mxu0 %v8061
  %11311 = vmatpush1.xpose.msra.mxu0 %v8060
  %11312 = vmatprep.subr.mxu0 %v8077
  %11313 = vmatpush1.xpose.msra.mxu0 %v8076
  %11314 = vmatprep.subr.mxu0 %v8093
  %11315 = vmatpush1.xpose.msra.mxu0 %v8092
  %11316 = vmatprep.subr.mxu0 %v8109
  %11317 = vmatpush1.xpose.msra.mxu0 %v8108
  %11318 = vmatprep.subr.mxu0 %v8125
  %11319 = vmatpush1.xpose.msra.mxu0 %v8124
  %11320 = vmatprep.subr.mxu0 %v8141
  %11321 = vmatpush1.xpose.msra.mxu0 %v8140
  %11322 = vmatprep.subr.mxu0 %v8157
  %11323 = vmatpush1.xpose.msra.mxu0 %v8156
  %11324 = vmatprep.subr.mxu0 %v8173
  %11325 = vmatpush1.xpose.msra.mxu0 %v8172
  %11326 = vmatprep.subr.mxu0 %v8189
  %11327 = vmatpush1.xpose.msra.mxu0 %v8188
  %11328 = vmatprep.subr.mxu0 %v8205
  %11329 = vmatpush1.xpose.msra.mxu0 %v8204
  %11330 = vmatprep.subr.mxu0 %v8221
  %11331 = vmatpush1.xpose.msra.mxu0 %v8220
  %11332 = vmatprep.subr.mxu0 %v8237
  %11333 = vmatpush1.xpose.msra.mxu0 %v8236
  %11334 = vmatprep.subr.mxu0 %v8253
  %11335 = vmatpush1.xpose.msra.mxu0 %v8252
  %11336 = vmatprep.subr.mxu0 %v8269
  %11337 = vmatpush1.xpose.msra.mxu0 %v8268
  %11338 = vmatprep.subr.mxu0 %v8285
  %11339 = vmatpush1.xpose.msra.mxu0 %v8284
  %11340 = vmatprep.subr.mxu0 %v8301
  %11341 = vmatpush1.xpose.msra.mxu0 %v8300
  %11342 = vmatprep.subr.mxu0 %v8317
  %11343 = vmatpush1.xpose.msra.mxu0 %v8316
  %11344 = vmatprep.subr.mxu0 %v8333
  %11345 = vmatpush1.xpose.msra.mxu0 %v8332
  %11346 = vmatprep.subr.mxu0 %v8349
  %11347 = vmatpush1.xpose.msra.mxu0 %v8348
  %11348 = vmatprep.subr.mxu0 %v8365
  %11349 = vmatpush1.xpose.msra.mxu0 %v8364
  %11350 = vmatprep.subr.mxu0 %v8381
  %11351 = vmatpush1.xpose.msra.mxu0 %v8380
  %11352 = vmatprep.subr.mxu0 %v8397
  %11353 = vmatpush1.xpose.msra.mxu0 %v8396
  %11354 = vmatprep.subr.mxu0 %v8413
  %11355 = vmatpush1.xpose.msra.mxu0 %v8412
  %11356 = vmatprep.mubr.f32.mxu0 1.0
  %11357 = vmatmul.mubr.f32.gmra.mrb[0].mxu0 1.0
  %v11358 = vpop.f32.mrb[0].mxu0
  %v11359 = vadd.f32 %v11288, %v11358
  %v11360 = vpop.f32.mrb[0].mxu0
  %v11361 = vadd.f32 %v11290, %v11360
  %11362 = vdwg.mxu0
  %11363 = vmatprep.subr.mxu0 %v7919
  %11364 = vmatpush1.xpose.msra.mxu0 %v7918
  %11365 = vmatprep.subr.mxu0 %v7935
  %11366 = vmatpush1.xpose.msra.mxu0 %v7934
  %11367 = vmatprep.subr.mxu0 %v7951
  %11368 = vmatpush1.xpose.msra.mxu0 %v7950
  %11369 = vmatprep.subr.mxu0 %v7967
  %11370 = vmatpush1.xpose.msra.mxu0 %v7966
  %11371 = vmatprep.subr.mxu0 %v7983
  %11372 = vmatpush1.xpose.msra.mxu0 %v7982
  %11373 = vmatprep.subr.mxu0 %v7999
  %11374 = vmatpush1.xpose.msra.mxu0 %v7998
  %11375 = vmatprep.subr.mxu0 %v8015
  %11376 = vmatpush1.xpose.msra.mxu0 %v8014
  %11377 = vmatprep.subr.mxu0 %v8031
  %11378 = vmatpush1.xpose.msra.mxu0 %v8030
  %11379 = vmatprep.subr.mxu0 %v8047
  %11380 = vmatpush1.xpose.msra.mxu0 %v8046
  %11381 = vmatprep.subr.mxu0 %v8063
  %11382 = vmatpush1.xpose.msra.mxu0 %v8062
  %11383 = vmatprep.subr.mxu0 %v8079
  %11384 = vmatpush1.xpose.msra.mxu0 %v8078
  %11385 = vmatprep.subr.mxu0 %v8095
  %11386 = vmatpush1.xpose.msra.mxu0 %v8094
  %11387 = vmatprep.subr.mxu0 %v8111
  %11388 = vmatpush1.xpose.msra.mxu0 %v8110
  %11389 = vmatprep.subr.mxu0 %v8127
  %11390 = vmatpush1.xpose.msra.mxu0 %v8126
  %11391 = vmatprep.subr.mxu0 %v8143
  %11392 = vmatpush1.xpose.msra.mxu0 %v8142
  %11393 = vmatprep.subr.mxu0 %v8159
  %11394 = vmatpush1.xpose.msra.mxu0 %v8158
  %11395 = vmatprep.subr.mxu0 %v8175
  %11396 = vmatpush1.xpose.msra.mxu0 %v8174
  %11397 = vmatprep.subr.mxu0 %v8191
  %11398 = vmatpush1.xpose.msra.mxu0 %v8190
  %11399 = vmatprep.subr.mxu0 %v8207
  %11400 = vmatpush1.xpose.msra.mxu0 %v8206
  %11401 = vmatprep.subr.mxu0 %v8223
  %11402 = vmatpush1.xpose.msra.mxu0 %v8222
  %11403 = vmatprep.subr.mxu0 %v8239
  %11404 = vmatpush1.xpose.msra.mxu0 %v8238
  %11405 = vmatprep.subr.mxu0 %v8255
  %11406 = vmatpush1.xpose.msra.mxu0 %v8254
  %11407 = vmatprep.subr.mxu0 %v8271
  %11408 = vmatpush1.xpose.msra.mxu0 %v8270
  %11409 = vmatprep.subr.mxu0 %v8287
  %11410 = vmatpush1.xpose.msra.mxu0 %v8286
  %11411 = vmatprep.subr.mxu0 %v8303
  %11412 = vmatpush1.xpose.msra.mxu0 %v8302
  %11413 = vmatprep.subr.mxu0 %v8319
  %11414 = vmatpush1.xpose.msra.mxu0 %v8318
  %11415 = vmatprep.subr.mxu0 %v8335
  %11416 = vmatpush1.xpose.msra.mxu0 %v8334
  %11417 = vmatprep.subr.mxu0 %v8351
  %11418 = vmatpush1.xpose.msra.mxu0 %v8350
  %11419 = vmatprep.subr.mxu0 %v8367
  %11420 = vmatpush1.xpose.msra.mxu0 %v8366
  %11421 = vmatprep.subr.mxu0 %v8383
  %11422 = vmatpush1.xpose.msra.mxu0 %v8382
  %11423 = vmatprep.subr.mxu0 %v8399
  %11424 = vmatpush1.xpose.msra.mxu0 %v8398
  %11425 = vmatprep.subr.mxu0 %v8415
  %11426 = vmatpush1.xpose.msra.mxu0 %v8414
  %11427 = vmatprep.mubr.f32.mxu0 1.0
  %11428 = vmatmul.mubr.f32.gmra.mrb[0].mxu0 1.0
  %v11429 = vpop.f32.mrb[0].mxu0
  %v11430 = vadd.f32 %v11359, %v11429
  %v11431 = vpop.f32.mrb[0].mxu0
  %v11432 = vadd.f32 %v11361, %v11431
  %11433 = vdwg.mxu0
  %11434 = vmatprep.subr.mxu0 %v7921
  %11435 = vmatpush1.xpose.msra.mxu0 %v7920
  %11436 = vmatprep.subr.mxu0 %v7937
  %11437 = vmatpush1.xpose.msra.mxu0 %v7936
  %11438 = vmatprep.subr.mxu0 %v7953
  %11439 = vmatpush1.xpose.msra.mxu0 %v7952
  %11440 = vmatprep.subr.mxu0 %v7969
  %11441 = vmatpush1.xpose.msra.mxu0 %v7968
  %11442 = vmatprep.subr.mxu0 %v7985
  %11443 = vmatpush1.xpose.msra.mxu0 %v7984
  %11444 = vmatprep.subr.mxu0 %v8001
  %11445 = vmatpush1.xpose.msra.mxu0 %v8000
  %11446 = vmatprep.subr.mxu0 %v8017
  %11447 = vmatpush1.xpose.msra.mxu0 %v8016
  %11448 = vmatprep.subr.mxu0 %v8033
  %11449 = vmatpush1.xpose.msra.mxu0 %v8032
  %11450 = vmatprep.subr.mxu0 %v8049
  %11451 = vmatpush1.xpose.msra.mxu0 %v8048
  %11452 = vmatprep.subr.mxu0 %v8065
  %11453 = vmatpush1.xpose.msra.mxu0 %v8064
  %11454 = vmatprep.subr.mxu0 %v8081
  %11455 = vmatpush1.xpose.msra.mxu0 %v8080
  %11456 = vmatprep.subr.mxu0 %v8097
  %11457 = vmatpush1.xpose.msra.mxu0 %v8096
  %11458 = vmatprep.subr.mxu0 %v8113
  %11459 = vmatpush1.xpose.msra.mxu0 %v8112
  %11460 = vmatprep.subr.mxu0 %v8129
  %11461 = vmatpush1.xpose.msra.mxu0 %v8128
  %11462 = vmatprep.subr.mxu0 %v8145
  %11463 = vmatpush1.xpose.msra.mxu0 %v8144
  %11464 = vmatprep.subr.mxu0 %v8161
  %11465 = vmatpush1.xpose.msra.mxu0 %v8160
  %11466 = vmatprep.subr.mxu0 %v8177
  %11467 = vmatpush1.xpose.msra.mxu0 %v8176
  %11468 = vmatprep.subr.mxu0 %v8193
  %11469 = vmatpush1.xpose.msra.mxu0 %v8192
  %11470 = vmatprep.subr.mxu0 %v8209
  %11471 = vmatpush1.xpose.msra.mxu0 %v8208
  %11472 = vmatprep.subr.mxu0 %v8225
  %11473 = vmatpush1.xpose.msra.mxu0 %v8224
  %11474 = vmatprep.subr.mxu0 %v8241
  %11475 = vmatpush1.xpose.msra.mxu0 %v8240
  %11476 = vmatprep.subr.mxu0 %v8257
  %11477 = vmatpush1.xpose.msra.mxu0 %v8256
  %11478 = vmatprep.subr.mxu0 %v8273
  %11479 = vmatpush1.xpose.msra.mxu0 %v8272
  %11480 = vmatprep.subr.mxu0 %v8289
  %11481 = vmatpush1.xpose.msra.mxu0 %v8288
  %11482 = vmatprep.subr.mxu0 %v8305
  %11483 = vmatpush1.xpose.msra.mxu0 %v8304
  %11484 = vmatprep.subr.mxu0 %v8321
  %11485 = vmatpush1.xpose.msra.mxu0 %v8320
  %11486 = vmatprep.subr.mxu0 %v8337
  %11487 = vmatpush1.xpose.msra.mxu0 %v8336
  %11488 = vmatprep.subr.mxu0 %v8353
  %11489 = vmatpush1.xpose.msra.mxu0 %v8352
  %11490 = vmatprep.subr.mxu0 %v8369
  %11491 = vmatpush1.xpose.msra.mxu0 %v8368
  %11492 = vmatprep.subr.mxu0 %v8385
  %11493 = vmatpush1.xpose.msra.mxu0 %v8384
  %11494 = vmatprep.subr.mxu0 %v8401
  %11495 = vmatpush1.xpose.msra.mxu0 %v8400
  %11496 = vmatprep.subr.mxu0 %v8417
  %11497 = vmatpush1.xpose.msra.mxu0 %v8416
  %11498 = vmatprep.mubr.f32.mxu0 1.0
  %11499 = vmatmul.mubr.f32.gmra.mrb[0].mxu0 1.0
  %v11500 = vpop.f32.mrb[0].mxu0
  %v11501 = vadd.f32 %v11430, %v11500
  %v11502 = vpop.f32.mrb[0].mxu0
  %v11503 = vadd.f32 %v11432, %v11502
  %11504 = vdwg.mxu0
  %11505 = vmatprep.subr.mxu0 %v7923
  %11506 = vmatpush1.xpose.msra.mxu0 %v7922
  %11507 = vmatprep.subr.mxu0 %v7939
  %11508 = vmatpush1.xpose.msra.mxu0 %v7938
  %11509 = vmatprep.subr.mxu0 %v7955
  %11510 = vmatpush1.xpose.msra.mxu0 %v7954
  %11511 = vmatprep.subr.mxu0 %v7971
  %11512 = vmatpush1.xpose.msra.mxu0 %v7970
  %11513 = vmatprep.subr.mxu0 %v7987
  %11514 = vmatpush1.xpose.msra.mxu0 %v7986
  %11515 = vmatprep.subr.mxu0 %v8003
  %11516 = vmatpush1.xpose.msra.mxu0 %v8002
  %11517 = vmatprep.subr.mxu0 %v8019
  %11518 = vmatpush1.xpose.msra.mxu0 %v8018
  %11519 = vmatprep.subr.mxu0 %v8035
  %11520 = vmatpush1.xpose.msra.mxu0 %v8034
  %11521 = vmatprep.subr.mxu0 %v8051
  %11522 = vmatpush1.xpose.msra.mxu0 %v8050
  %11523 = vmatprep.subr.mxu0 %v8067
  %11524 = vmatpush1.xpose.msra.mxu0 %v8066
  %11525 = vmatprep.subr.mxu0 %v8083
  %11526 = vmatpush1.xpose.msra.mxu0 %v8082
  %11527 = vmatprep.subr.mxu0 %v8099
  %11528 = vmatpush1.xpose.msra.mxu0 %v8098
  %11529 = vmatprep.subr.mxu0 %v8115
  %11530 = vmatpush1.xpose.msra.mxu0 %v8114
  %11531 = vmatprep.subr.mxu0 %v8131
  %11532 = vmatpush1.xpose.msra.mxu0 %v8130
  %11533 = vmatprep.subr.mxu0 %v8147
  %11534 = vmatpush1.xpose.msra.mxu0 %v8146
  %11535 = vmatprep.subr.mxu0 %v8163
  %11536 = vmatpush1.xpose.msra.mxu0 %v8162
  %11537 = vmatprep.subr.mxu0 %v8179
  %11538 = vmatpush1.xpose.msra.mxu0 %v8178
  %11539 = vmatprep.subr.mxu0 %v8195
  %11540 = vmatpush1.xpose.msra.mxu0 %v8194
  %11541 = vmatprep.subr.mxu0 %v8211
  %11542 = vmatpush1.xpose.msra.mxu0 %v8210
  %11543 = vmatprep.subr.mxu0 %v8227
  %11544 = vmatpush1.xpose.msra.mxu0 %v8226
  %11545 = vmatprep.subr.mxu0 %v8243
  %11546 = vmatpush1.xpose.msra.mxu0 %v8242
  %11547 = vmatprep.subr.mxu0 %v8259
  %11548 = vmatpush1.xpose.msra.mxu0 %v8258
  %11549 = vmatprep.subr.mxu0 %v8275
  %11550 = vmatpush1.xpose.msra.mxu0 %v8274
  %11551 = vmatprep.subr.mxu0 %v8291
  %11552 = vmatpush1.xpose.msra.mxu0 %v8290
  %11553 = vmatprep.subr.mxu0 %v8307
  %11554 = vmatpush1.xpose.msra.mxu0 %v8306
  %11555 = vmatprep.subr.mxu0 %v8323
  %11556 = vmatpush1.xpose.msra.mxu0 %v8322
  %11557 = vmatprep.subr.mxu0 %v8339
  %11558 = vmatpush1.xpose.msra.mxu0 %v8338
  %11559 = vmatprep.subr.mxu0 %v8355
  %11560 = vmatpush1.xpose.msra.mxu0 %v8354
  %11561 = vmatprep.subr.mxu0 %v8371
  %11562 = vmatpush1.xpose.msra.mxu0 %v8370
  %11563 = vmatprep.subr.mxu0 %v8387
  %11564 = vmatpush1.xpose.msra.mxu0 %v8386
  %11565 = vmatprep.subr.mxu0 %v8403
  %11566 = vmatpush1.xpose.msra.mxu0 %v8402
  %11567 = vmatprep.subr.mxu0 %v8419
  %11568 = vmatpush1.xpose.msra.mxu0 %v8418
  %11569 = vmatprep.mubr.f32.mxu0 1.0
  %11570 = vmatmul.mubr.f32.gmra.mrb[0].mxu0 1.0
  %v11571 = vpop.f32.mrb[0].mxu0
  %v11572 = vadd.f32 %v11501, %v11571
  %v11573 = vpop.f32.mrb[0].mxu0
  %v11574 = vadd.f32 %v11503, %v11573
  %11575 = vdwg.mxu0
  %11576 = vmatprep.subr.mxu0 %v7925
  %11577 = vmatpush1.xpose.msra.mxu0 %v7924
  %11578 = vmatprep.subr.mxu0 %v7941
  %11579 = vmatpush1.xpose.msra.mxu0 %v7940
  %11580 = vmatprep.subr.mxu0 %v7957
  %11581 = vmatpush1.xpose.msra.mxu0 %v7956
  %11582 = vmatprep.subr.mxu0 %v7973
  %11583 = vmatpush1.xpose.msra.mxu0 %v7972
  %11584 = vmatprep.subr.mxu0 %v7989
  %11585 = vmatpush1.xpose.msra.mxu0 %v7988
  %11586 = vmatprep.subr.mxu0 %v8005
  %11587 = vmatpush1.xpose.msra.mxu0 %v8004
  %11588 = vmatprep.subr.mxu0 %v8021
  %11589 = vmatpush1.xpose.msra.mxu0 %v8020
  %11590 = vmatprep.subr.mxu0 %v8037
  %11591 = vmatpush1.xpose.msra.mxu0 %v8036
  %11592 = vmatprep.subr.mxu0 %v8053
  %11593 = vmatpush1.xpose.msra.mxu0 %v8052
  %11594 = vmatprep.subr.mxu0 %v8069
  %11595 = vmatpush1.xpose.msra.mxu0 %v8068
  %11596 = vmatprep.subr.mxu0 %v8085
  %11597 = vmatpush1.xpose.msra.mxu0 %v8084
  %11598 = vmatprep.subr.mxu0 %v8101
  %11599 = vmatpush1.xpose.msra.mxu0 %v8100
  %11600 = vmatprep.subr.mxu0 %v8117
  %11601 = vmatpush1.xpose.msra.mxu0 %v8116
  %11602 = vmatprep.subr.mxu0 %v8133
  %11603 = vmatpush1.xpose.msra.mxu0 %v8132
  %11604 = vmatprep.subr.mxu0 %v8149
  %11605 = vmatpush1.xpose.msra.mxu0 %v8148
  %11606 = vmatprep.subr.mxu0 %v8165
  %11607 = vmatpush1.xpose.msra.mxu0 %v8164
  %11608 = vmatprep.subr.mxu0 %v8181
  %11609 = vmatpush1.xpose.msra.mxu0 %v8180
  %11610 = vmatprep.subr.mxu0 %v8197
  %11611 = vmatpush1.xpose.msra.mxu0 %v8196
  %11612 = vmatprep.subr.mxu0 %v8213
  %11613 = vmatpush1.xpose.msra.mxu0 %v8212
  %11614 = vmatprep.subr.mxu0 %v8229
  %11615 = vmatpush1.xpose.msra.mxu0 %v8228
  %11616 = vmatprep.subr.mxu0 %v8245
  %11617 = vmatpush1.xpose.msra.mxu0 %v8244
  %11618 = vmatprep.subr.mxu0 %v8261
  %11619 = vmatpush1.xpose.msra.mxu0 %v8260
  %11620 = vmatprep.subr.mxu0 %v8277
  %11621 = vmatpush1.xpose.msra.mxu0 %v8276
  %11622 = vmatprep.subr.mxu0 %v8293
  %11623 = vmatpush1.xpose.msra.mxu0 %v8292
  %11624 = vmatprep.subr.mxu0 %v8309
  %11625 = vmatpush1.xpose.msra.mxu0 %v8308
  %11626 = vmatprep.subr.mxu0 %v8325
  %11627 = vmatpush1.xpose.msra.mxu0 %v8324
  %11628 = vmatprep.subr.mxu0 %v8341
  %11629 = vmatpush1.xpose.msra.mxu0 %v8340
  %11630 = vmatprep.subr.mxu0 %v8357
  %11631 = vmatpush1.xpose.msra.mxu0 %v8356
  %11632 = vmatprep.subr.mxu0 %v8373
  %11633 = vmatpush1.xpose.msra.mxu0 %v8372
  %11634 = vmatprep.subr.mxu0 %v8389
  %11635 = vmatpush1.xpose.msra.mxu0 %v8388
  %11636 = vmatprep.subr.mxu0 %v8405
  %11637 = vmatpush1.xpose.msra.mxu0 %v8404
  %11638 = vmatprep.subr.mxu0 %v8421
  %11639 = vmatpush1.xpose.msra.mxu0 %v8420
  %11640 = vmatprep.mubr.f32.mxu0 1.0
  %11641 = vmatmul.mubr.f32.gmra.mrb[0].mxu0 1.0
  %v11642 = vpop.f32.mrb[0].mxu0
  %v11643 = vadd.f32 %v11572, %v11642
  %v11644 = vpop.f32.mrb[0].mxu0
  %v11645 = vadd.f32 %v11574, %v11644
  %11646 = vdwg.mxu0
  %v11649 = vcombine.low %v11643, %v11645
  %v11651 = vunpack.c.l.s4 1966171168
  %v11652 = vunpack.c.0.s8 %v11651
  %v11653 = vlaneseq
  %v11654 = vshrl.u32 %v11653, 7
  %v11655 = vsub.s32 %v11652, %v11654
  %v11656 = vrot.slane %v11649, %v11655
  %v11658 = vunpack.c.l.s4 1966171168
  %v11659 = vunpack.c.0.s8 %v11658
  %v11660 = vlaneseq
  %v11661 = vshrl.u32 %v11660, 7
  %v11662 = vsub.s32 %v11659, %v11661
  %v11663 = vrot.slane %v11656, %v11662
  %v11665 = vlaneseq
  %vm11666 = vcmp.ge.s32.totalorder %v11665, 0
  %vm11667 = vcmp.lt.s32.totalorder %v11665, 256
  %vm11668 = vmand %vm11666, %vm11667
  %11669 = vst.msk [vmem:[%s6] sm:$0x3] %vm11668, %v11663
  %v11670 = vsub.f32 %v9545, %v21
  %v11671 = vsub.f32 %v9550, %v22
  %v11672 = vsub.f32 %v9555, %v23
  %v11673 = vsub.f32 %v9560, %v24
  %v11674 = vsub.f32 %v9565, %v25
  %v11675 = vsub.f32 %v9570, %v26
  %v11676 = vsub.f32 %v9575, %v27
  %v11677 = vsub.f32 %v9580, %v28
  %v11678 = vsub.f32 %v9585, %v29
  %v11679 = vsub.f32 %v9590, %v30
  %v11680 = vsub.f32 %v9595, %v31
  %v11681 = vsub.f32 %v9600, %v32
  %v11682 = vsub.f32 %v9605, %v33
  %v11683 = vsub.f32 %v9610, %v34
  %v11684 = vsub.f32 %v9615, %v35
  %v11685 = vsub.f32 %v9620, %v36
  %v11686 = vsub.f32 %v9625, %v37
  %v11687 = vsub.f32 %v9630, %v38
  %v11688 = vsub.f32 %v9635, %v39
  %v11689 = vsub.f32 %v9640, %v40
  %v11690 = vsub.f32 %v9645, %v41
  %v11691 = vsub.f32 %v9650, %v42
  %v11692 = vsub.f32 %v9655, %v43
  %v11693 = vsub.f32 %v9660, %v44
  %v11694 = vsub.f32 %v9665, %v45
  %v11695 = vsub.f32 %v9670, %v46
  %v11696 = vsub.f32 %v9675, %v47
  %v11697 = vsub.f32 %v9680, %v48
  %v11698 = vsub.f32 %v9685, %v49
  %v11699 = vsub.f32 %v9690, %v50
  %v11700 = vsub.f32 %v9695, %v51
  %v11701 = vsub.f32 %v9700, %v52
  %v11702 = vsub.f32 %v9705, %v53
  %v11703 = vsub.f32 %v9710, %v54
  %v11704 = vsub.f32 %v9715, %v55
  %v11705 = vsub.f32 %v9720, %v56
  %v11706 = vsub.f32 %v9725, %v57
  %v11707 = vsub.f32 %v9730, %v58
  %v11708 = vsub.f32 %v9735, %v59
  %v11709 = vsub.f32 %v9740, %v60
  %v11710 = vsub.f32 %v9745, %v61
  %v11711 = vsub.f32 %v9750, %v62
  %v11712 = vsub.f32 %v9755, %v63
  %v11713 = vsub.f32 %v9760, %v64
  %v11714 = vsub.f32 %v9765, %v65
  %v11715 = vsub.f32 %v9770, %v66
  %v11716 = vsub.f32 %v9775, %v67
  %v11717 = vsub.f32 %v9780, %v68
  %v11718 = vsub.f32 %v9785, %v69
  %v11719 = vsub.f32 %v9790, %v70
  %v11720 = vsub.f32 %v9795, %v71
  %v11721 = vsub.f32 %v9800, %v72
  %v11722 = vsub.f32 %v9805, %v73
  %v11723 = vsub.f32 %v9810, %v74
  %v11724 = vsub.f32 %v9815, %v75
  %v11725 = vsub.f32 %v9820, %v76
  %v11726 = vsub.f32 %v9825, %v77
  %v11727 = vsub.f32 %v9830, %v78
  %v11728 = vsub.f32 %v9835, %v79
  %v11729 = vsub.f32 %v9840, %v80
  %v11730 = vsub.f32 %v9845, %v81
  %v11731 = vsub.f32 %v9850, %v82
  %v11732 = vsub.f32 %v9855, %v83
  %v11733 = vsub.f32 %v9860, %v84
  %v11734 = vsub.f32 %v9865, %v85
  %v11735 = vsub.f32 %v9870, %v86
  %v11736 = vsub.f32 %v9875, %v87
  %v11737 = vsub.f32 %v9880, %v88
  %v11738 = vsub.f32 %v9885, %v89
  %v11739 = vsub.f32 %v9890, %v90
  %v11740 = vsub.f32 %v9895, %v91
  %v11741 = vsub.f32 %v9900, %v92
  %v11742 = vsub.f32 %v9905, %v93
  %v11743 = vsub.f32 %v9910, %v94
  %v11744 = vsub.f32 %v9915, %v95
  %v11745 = vsub.f32 %v9920, %v96
  %v11746 = vsub.f32 %v9925, %v97
  %v11747 = vsub.f32 %v9930, %v98
  %v11748 = vsub.f32 %v9935, %v99
  %v11749 = vsub.f32 %v9940, %v100
  %v11750 = vsub.f32 %v9945, %v101
  %v11751 = vsub.f32 %v9950, %v102
  %v11752 = vsub.f32 %v9955, %v103
  %v11753 = vsub.f32 %v9960, %v104
  %v11754 = vsub.f32 %v9965, %v105
  %v11755 = vsub.f32 %v9970, %v106
  %v11756 = vsub.f32 %v9975, %v107
  %v11757 = vsub.f32 %v9980, %v108
  %v11758 = vsub.f32 %v9985, %v109
  %v11759 = vsub.f32 %v9990, %v110
  %v11760 = vsub.f32 %v9995, %v111
  %v11761 = vsub.f32 %v10000, %v112
  %v11762 = vsub.f32 %v10005, %v113
  %v11763 = vsub.f32 %v10010, %v114
  %v11764 = vsub.f32 %v10015, %v115
  %v11765 = vsub.f32 %v10020, %v116
  %v11766 = vsub.f32 %v10025, %v117
  %v11767 = vsub.f32 %v10030, %v118
  %v11768 = vsub.f32 %v10035, %v119
  %v11769 = vsub.f32 %v10040, %v120
  %v11770 = vsub.f32 %v10045, %v121
  %v11771 = vsub.f32 %v10050, %v122
  %v11772 = vsub.f32 %v10055, %v123
  %v11773 = vsub.f32 %v10060, %v124
  %v11774 = vsub.f32 %v10065, %v125
  %v11775 = vsub.f32 %v10070, %v126
  %v11776 = vsub.f32 %v10075, %v127
  %v11777 = vsub.f32 %v10080, %v128
  %v11778 = vsub.f32 %v10085, %v129
  %v11779 = vsub.f32 %v10090, %v130
  %v11780 = vsub.f32 %v10095, %v131
  %v11781 = vsub.f32 %v10100, %v132
  %v11782 = vsub.f32 %v10105, %v133
  %v11783 = vsub.f32 %v10110, %v134
  %v11784 = vsub.f32 %v10115, %v135
  %v11785 = vsub.f32 %v10120, %v136
  %v11786 = vsub.f32 %v10125, %v137
  %v11787 = vsub.f32 %v10130, %v138
  %v11788 = vsub.f32 %v10135, %v139
  %v11789 = vsub.f32 %v10140, %v140
  %v11790 = vsub.f32 %v10145, %v141
  %v11791 = vsub.f32 %v10150, %v142
  %v11792 = vsub.f32 %v10155, %v143
  %v11793 = vsub.f32 %v10160, %v144
  %v11794 = vsub.f32 %v10165, %v145
  %v11795 = vsub.f32 %v10170, %v146
  %v11796 = vsub.f32 %v10175, %v147
  %v11797 = vsub.f32 %v10180, %v148
  %v11798 = vsub.f32 %v10185, %v149
  %v11799 = vsub.f32 %v10190, %v150
  %v11800 = vsub.f32 %v10195, %v151
  %v11801 = vsub.f32 %v10200, %v152
  %v11802 = vsub.f32 %v10205, %v153
  %v11803 = vsub.f32 %v10210, %v154
  %v11804 = vsub.f32 %v10215, %v155
  %v11805 = vsub.f32 %v10220, %v156
  %v11806 = vsub.f32 %v10225, %v157
  %v11807 = vsub.f32 %v10230, %v158
  %v11808 = vsub.f32 %v10235, %v159
  %v11809 = vsub.f32 %v10240, %v160
  %v11810 = vsub.f32 %v10245, %v161
  %v11811 = vsub.f32 %v10250, %v162
  %v11812 = vsub.f32 %v10255, %v163
  %v11813 = vsub.f32 %v10260, %v164
  %v11814 = vsub.f32 %v10265, %v165
  %v11815 = vsub.f32 %v10270, %v166
  %v11816 = vsub.f32 %v10275, %v167
  %v11817 = vsub.f32 %v10280, %v168
  %v11818 = vsub.f32 %v10285, %v169
  %v11819 = vsub.f32 %v10290, %v170
  %v11820 = vsub.f32 %v10295, %v171
  %v11821 = vsub.f32 %v10300, %v172
  %v11822 = vsub.f32 %v10305, %v173
  %v11823 = vsub.f32 %v10310, %v174
  %v11824 = vsub.f32 %v10315, %v175
  %v11825 = vsub.f32 %v10320, %v176
  %v11826 = vsub.f32 %v10325, %v177
  %v11827 = vsub.f32 %v10330, %v178
  %v11828 = vsub.f32 %v10335, %v179
  %v11829 = vsub.f32 %v10340, %v180
  %v11830 = vsub.f32 %v10345, %v181
  %v11831 = vsub.f32 %v10350, %v182
  %v11832 = vsub.f32 %v10355, %v183
  %v11833 = vsub.f32 %v10360, %v184
  %v11834 = vsub.f32 %v10365, %v185
  %v11835 = vsub.f32 %v10370, %v186
  %v11836 = vsub.f32 %v10375, %v187
  %v11837 = vsub.f32 %v10380, %v188
  %v11838 = vsub.f32 %v10385, %v189
  %v11839 = vsub.f32 %v10390, %v190
  %v11840 = vsub.f32 %v10395, %v191
  %v11841 = vsub.f32 %v10400, %v192
  %v11842 = vsub.f32 %v10405, %v193
  %v11843 = vsub.f32 %v10410, %v194
  %v11844 = vsub.f32 %v10415, %v195
  %v11845 = vsub.f32 %v10420, %v196
  %v11846 = vsub.f32 %v10425, %v197
  %v11847 = vsub.f32 %v10430, %v198
  %v11848 = vsub.f32 %v10435, %v199
  %v11849 = vsub.f32 %v10440, %v200
  %v11850 = vsub.f32 %v10445, %v201
  %v11851 = vsub.f32 %v10450, %v202
  %v11852 = vsub.f32 %v10455, %v203
  %v11853 = vsub.f32 %v10460, %v204
  %v11854 = vsub.f32 %v10465, %v205
  %v11855 = vsub.f32 %v10470, %v206
  %v11856 = vsub.f32 %v10475, %v207
  %v11857 = vsub.f32 %v10480, %v208
  %v11858 = vsub.f32 %v10485, %v209
  %v11859 = vsub.f32 %v10490, %v210
  %v11860 = vsub.f32 %v10495, %v211
  %v11861 = vsub.f32 %v10500, %v212
  %v11862 = vsub.f32 %v10505, %v213
  %v11863 = vsub.f32 %v10510, %v214
  %v11864 = vsub.f32 %v10515, %v215
  %v11865 = vsub.f32 %v10520, %v216
  %v11866 = vsub.f32 %v10525, %v217
  %v11867 = vsub.f32 %v10530, %v218
  %v11868 = vsub.f32 %v10535, %v219
  %v11869 = vsub.f32 %v10540, %v220
  %v11870 = vsub.f32 %v10545, %v221
  %v11871 = vsub.f32 %v10550, %v222
  %v11872 = vsub.f32 %v10555, %v223
  %v11873 = vsub.f32 %v10560, %v224
  %v11874 = vsub.f32 %v10565, %v225
  %v11875 = vsub.f32 %v10570, %v226
  %v11876 = vsub.f32 %v10575, %v227
  %v11877 = vsub.f32 %v10580, %v228
  %v11878 = vsub.f32 %v10585, %v229
  %v11879 = vsub.f32 %v10590, %v230
  %v11880 = vsub.f32 %v10595, %v231
  %v11881 = vsub.f32 %v10600, %v232
  %v11882 = vsub.f32 %v10605, %v233
  %v11883 = vsub.f32 %v10610, %v234
  %v11884 = vsub.f32 %v10615, %v235
  %v11885 = vsub.f32 %v10620, %v236
  %v11886 = vsub.f32 %v10625, %v237
  %v11887 = vsub.f32 %v10630, %v238
  %v11888 = vsub.f32 %v10635, %v239
  %v11889 = vsub.f32 %v10640, %v240
  %v11890 = vsub.f32 %v10645, %v241
  %v11891 = vsub.f32 %v10650, %v242
  %v11892 = vsub.f32 %v10655, %v243
  %v11893 = vsub.f32 %v10660, %v244
  %v11894 = vsub.f32 %v10665, %v245
  %v11895 = vsub.f32 %v10670, %v246
  %v11896 = vsub.f32 %v10675, %v247
  %v11897 = vsub.f32 %v10680, %v248
  %v11898 = vsub.f32 %v10685, %v249
  %v11899 = vsub.f32 %v10690, %v250
  %v11900 = vsub.f32 %v10695, %v251
  %v11901 = vsub.f32 %v10700, %v252
  %v11902 = vsub.f32 %v10705, %v253
  %v11903 = vsub.f32 %v10710, %v254
  %v11904 = vsub.f32 %v10715, %v255
  %v11905 = vsub.f32 %v10720, %v256
  %v11906 = vsub.f32 %v10725, %v257
  %v11907 = vsub.f32 %v10730, %v258
  %v11908 = vsub.f32 %v10735, %v259
  %v11909 = vsub.f32 %v10740, %v260
  %v11910 = vsub.f32 %v10745, %v261
  %v11911 = vsub.f32 %v10750, %v262
  %v11912 = vsub.f32 %v10755, %v263
  %v11913 = vsub.f32 %v10760, %v264
  %v11914 = vsub.f32 %v10765, %v265
  %v11915 = vsub.f32 %v10770, %v266
  %v11916 = vsub.f32 %v10775, %v267
  %v11917 = vsub.f32 %v10780, %v268
  %v11918 = vsub.f32 %v10785, %v269
  %v11919 = vsub.f32 %v10790, %v270
  %v11920 = vsub.f32 %v10795, %v271
  %v11921 = vsub.f32 %v10800, %v272
  %v11922 = vsub.f32 %v10805, %v273
  %v11923 = vsub.f32 %v10810, %v274
  %v11924 = vsub.f32 %v10815, %v275
  %v11925 = vsub.f32 %v10820, %v276
  %v11926 = vmul.f32 %v11670, %v11670
  %v11927 = vmul.f32 %v11671, %v11671
  %v11928 = vmul.f32 %v11672, %v11672
  %v11929 = vmul.f32 %v11673, %v11673
  %v11930 = vmul.f32 %v11674, %v11674
  %v11931 = vmul.f32 %v11675, %v11675
  %v11932 = vmul.f32 %v11676, %v11676
  %v11933 = vmul.f32 %v11677, %v11677
  %v11934 = vmul.f32 %v11678, %v11678
  %v11935 = vmul.f32 %v11679, %v11679
  %v11936 = vmul.f32 %v11680, %v11680
  %v11937 = vmul.f32 %v11681, %v11681
  %v11938 = vmul.f32 %v11682, %v11682
  %v11939 = vmul.f32 %v11683, %v11683
  %v11940 = vmul.f32 %v11684, %v11684
  %v11941 = vmul.f32 %v11685, %v11685
  %v11942 = vmul.f32 %v11686, %v11686
  %v11943 = vmul.f32 %v11687, %v11687
  %v11944 = vmul.f32 %v11688, %v11688
  %v11945 = vmul.f32 %v11689, %v11689
  %v11946 = vmul.f32 %v11690, %v11690
  %v11947 = vmul.f32 %v11691, %v11691
  %v11948 = vmul.f32 %v11692, %v11692
  %v11949 = vmul.f32 %v11693, %v11693
  %v11950 = vmul.f32 %v11694, %v11694
  %v11951 = vmul.f32 %v11695, %v11695
  %v11952 = vmul.f32 %v11696, %v11696
  %v11953 = vmul.f32 %v11697, %v11697
  %v11954 = vmul.f32 %v11698, %v11698
  %v11955 = vmul.f32 %v11699, %v11699
  %v11956 = vmul.f32 %v11700, %v11700
  %v11957 = vmul.f32 %v11701, %v11701
  %v11958 = vmul.f32 %v11702, %v11702
  %v11959 = vmul.f32 %v11703, %v11703
  %v11960 = vmul.f32 %v11704, %v11704
  %v11961 = vmul.f32 %v11705, %v11705
  %v11962 = vmul.f32 %v11706, %v11706
  %v11963 = vmul.f32 %v11707, %v11707
  %v11964 = vmul.f32 %v11708, %v11708
  %v11965 = vmul.f32 %v11709, %v11709
  %v11966 = vmul.f32 %v11710, %v11710
  %v11967 = vmul.f32 %v11711, %v11711
  %v11968 = vmul.f32 %v11712, %v11712
  %v11969 = vmul.f32 %v11713, %v11713
  %v11970 = vmul.f32 %v11714, %v11714
  %v11971 = vmul.f32 %v11715, %v11715
  %v11972 = vmul.f32 %v11716, %v11716
  %v11973 = vmul.f32 %v11717, %v11717
  %v11974 = vmul.f32 %v11718, %v11718
  %v11975 = vmul.f32 %v11719, %v11719
  %v11976 = vmul.f32 %v11720, %v11720
  %v11977 = vmul.f32 %v11721, %v11721
  %v11978 = vmul.f32 %v11722, %v11722
  %v11979 = vmul.f32 %v11723, %v11723
  %v11980 = vmul.f32 %v11724, %v11724
  %v11981 = vmul.f32 %v11725, %v11725
  %v11982 = vmul.f32 %v11726, %v11726
  %v11983 = vmul.f32 %v11727, %v11727
  %v11984 = vmul.f32 %v11728, %v11728
  %v11985 = vmul.f32 %v11729, %v11729
  %v11986 = vmul.f32 %v11730, %v11730
  %v11987 = vmul.f32 %v11731, %v11731
  %v11988 = vmul.f32 %v11732, %v11732
  %v11989 = vmul.f32 %v11733, %v11733
  %v11990 = vmul.f32 %v11734, %v11734
  %v11991 = vmul.f32 %v11735, %v11735
  %v11992 = vmul.f32 %v11736, %v11736
  %v11993 = vmul.f32 %v11737, %v11737
  %v11994 = vmul.f32 %v11738, %v11738
  %v11995 = vmul.f32 %v11739, %v11739
  %v11996 = vmul.f32 %v11740, %v11740
  %v11997 = vmul.f32 %v11741, %v11741
  %v11998 = vmul.f32 %v11742, %v11742
  %v11999 = vmul.f32 %v11743, %v11743
  %v12000 = vmul.f32 %v11744, %v11744
  %v12001 = vmul.f32 %v11745, %v11745
  %v12002 = vmul.f32 %v11746, %v11746
  %v12003 = vmul.f32 %v11747, %v11747
  %v12004 = vmul.f32 %v11748, %v11748
  %v12005 = vmul.f32 %v11749, %v11749
  %v12006 = vmul.f32 %v11750, %v11750
  %v12007 = vmul.f32 %v11751, %v11751
  %v12008 = vmul.f32 %v11752, %v11752
  %v12009 = vmul.f32 %v11753, %v11753
  %v12010 = vmul.f32 %v11754, %v11754
  %v12011 = vmul.f32 %v11755, %v11755
  %v12012 = vmul.f32 %v11756, %v11756
  %v12013 = vmul.f32 %v11757, %v11757
  %v12014 = vmul.f32 %v11758, %v11758
  %v12015 = vmul.f32 %v11759, %v11759
  %v12016 = vmul.f32 %v11760, %v11760
  %v12017 = vmul.f32 %v11761, %v11761
  %v12018 = vmul.f32 %v11762, %v11762
  %v12019 = vmul.f32 %v11763, %v11763
  %v12020 = vmul.f32 %v11764, %v11764
  %v12021 = vmul.f32 %v11765, %v11765
  %v12022 = vmul.f32 %v11766, %v11766
  %v12023 = vmul.f32 %v11767, %v11767
  %v12024 = vmul.f32 %v11768, %v11768
  %v12025 = vmul.f32 %v11769, %v11769
  %v12026 = vmul.f32 %v11770, %v11770
  %v12027 = vmul.f32 %v11771, %v11771
  %v12028 = vmul.f32 %v11772, %v11772
  %v12029 = vmul.f32 %v11773, %v11773
  %v12030 = vmul.f32 %v11774, %v11774
  %v12031 = vmul.f32 %v11775, %v11775
  %v12032 = vmul.f32 %v11776, %v11776
  %v12033 = vmul.f32 %v11777, %v11777
  %v12034 = vmul.f32 %v11778, %v11778
  %v12035 = vmul.f32 %v11779, %v11779
  %v12036 = vmul.f32 %v11780, %v11780
  %v12037 = vmul.f32 %v11781, %v11781
  %v12038 = vmul.f32 %v11782, %v11782
  %v12039 = vmul.f32 %v11783, %v11783
  %v12040 = vmul.f32 %v11784, %v11784
  %v12041 = vmul.f32 %v11785, %v11785
  %v12042 = vmul.f32 %v11786, %v11786
  %v12043 = vmul.f32 %v11787, %v11787
  %v12044 = vmul.f32 %v11788, %v11788
  %v12045 = vmul.f32 %v11789, %v11789
  %v12046 = vmul.f32 %v11790, %v11790
  %v12047 = vmul.f32 %v11791, %v11791
  %v12048 = vmul.f32 %v11792, %v11792
  %v12049 = vmul.f32 %v11793, %v11793
  %v12050 = vmul.f32 %v11794, %v11794
  %v12051 = vmul.f32 %v11795, %v11795
  %v12052 = vmul.f32 %v11796, %v11796
  %v12053 = vmul.f32 %v11797, %v11797
  %v12054 = vmul.f32 %v11798, %v11798
  %v12055 = vmul.f32 %v11799, %v11799
  %v12056 = vmul.f32 %v11800, %v11800
  %v12057 = vmul.f32 %v11801, %v11801
  %v12058 = vmul.f32 %v11802, %v11802
  %v12059 = vmul.f32 %v11803, %v11803
  %v12060 = vmul.f32 %v11804, %v11804
  %v12061 = vmul.f32 %v11805, %v11805
  %v12062 = vmul.f32 %v11806, %v11806
  %v12063 = vmul.f32 %v11807, %v11807
  %v12064 = vmul.f32 %v11808, %v11808
  %v12065 = vmul.f32 %v11809, %v11809
  %v12066 = vmul.f32 %v11810, %v11810
  %v12067 = vmul.f32 %v11811, %v11811
  %v12068 = vmul.f32 %v11812, %v11812
  %v12069 = vmul.f32 %v11813, %v11813
  %v12070 = vmul.f32 %v11814, %v11814
  %v12071 = vmul.f32 %v11815, %v11815
  %v12072 = vmul.f32 %v11816, %v11816
  %v12073 = vmul.f32 %v11817, %v11817
  %v12074 = vmul.f32 %v11818, %v11818
  %v12075 = vmul.f32 %v11819, %v11819
  %v12076 = vmul.f32 %v11820, %v11820
  %v12077 = vmul.f32 %v11821, %v11821
  %v12078 = vmul.f32 %v11822, %v11822
  %v12079 = vmul.f32 %v11823, %v11823
  %v12080 = vmul.f32 %v11824, %v11824
  %v12081 = vmul.f32 %v11825, %v11825
  %v12082 = vmul.f32 %v11826, %v11826
  %v12083 = vmul.f32 %v11827, %v11827
  %v12084 = vmul.f32 %v11828, %v11828
  %v12085 = vmul.f32 %v11829, %v11829
  %v12086 = vmul.f32 %v11830, %v11830
  %v12087 = vmul.f32 %v11831, %v11831
  %v12088 = vmul.f32 %v11832, %v11832
  %v12089 = vmul.f32 %v11833, %v11833
  %v12090 = vmul.f32 %v11834, %v11834
  %v12091 = vmul.f32 %v11835, %v11835
  %v12092 = vmul.f32 %v11836, %v11836
  %v12093 = vmul.f32 %v11837, %v11837
  %v12094 = vmul.f32 %v11838, %v11838
  %v12095 = vmul.f32 %v11839, %v11839
  %v12096 = vmul.f32 %v11840, %v11840
  %v12097 = vmul.f32 %v11841, %v11841
  %v12098 = vmul.f32 %v11842, %v11842
  %v12099 = vmul.f32 %v11843, %v11843
  %v12100 = vmul.f32 %v11844, %v11844
  %v12101 = vmul.f32 %v11845, %v11845
  %v12102 = vmul.f32 %v11846, %v11846
  %v12103 = vmul.f32 %v11847, %v11847
  %v12104 = vmul.f32 %v11848, %v11848
  %v12105 = vmul.f32 %v11849, %v11849
  %v12106 = vmul.f32 %v11850, %v11850
  %v12107 = vmul.f32 %v11851, %v11851
  %v12108 = vmul.f32 %v11852, %v11852
  %v12109 = vmul.f32 %v11853, %v11853
  %v12110 = vmul.f32 %v11854, %v11854
  %v12111 = vmul.f32 %v11855, %v11855
  %v12112 = vmul.f32 %v11856, %v11856
  %v12113 = vmul.f32 %v11857, %v11857
  %v12114 = vmul.f32 %v11858, %v11858
  %v12115 = vmul.f32 %v11859, %v11859
  %v12116 = vmul.f32 %v11860, %v11860
  %v12117 = vmul.f32 %v11861, %v11861
  %v12118 = vmul.f32 %v11862, %v11862
  %v12119 = vmul.f32 %v11863, %v11863
  %v12120 = vmul.f32 %v11864, %v11864
  %v12121 = vmul.f32 %v11865, %v11865
  %v12122 = vmul.f32 %v11866, %v11866
  %v12123 = vmul.f32 %v11867, %v11867
  %v12124 = vmul.f32 %v11868, %v11868
  %v12125 = vmul.f32 %v11869, %v11869
  %v12126 = vmul.f32 %v11870, %v11870
  %v12127 = vmul.f32 %v11871, %v11871
  %v12128 = vmul.f32 %v11872, %v11872
  %v12129 = vmul.f32 %v11873, %v11873
  %v12130 = vmul.f32 %v11874, %v11874
  %v12131 = vmul.f32 %v11875, %v11875
  %v12132 = vmul.f32 %v11876, %v11876
  %v12133 = vmul.f32 %v11877, %v11877
  %v12134 = vmul.f32 %v11878, %v11878
  %v12135 = vmul.f32 %v11879, %v11879
  %v12136 = vmul.f32 %v11880, %v11880
  %v12137 = vmul.f32 %v11881, %v11881
  %v12138 = vmul.f32 %v11882, %v11882
  %v12139 = vmul.f32 %v11883, %v11883
  %v12140 = vmul.f32 %v11884, %v11884
  %v12141 = vmul.f32 %v11885, %v11885
  %v12142 = vmul.f32 %v11886, %v11886
  %v12143 = vmul.f32 %v11887, %v11887
  %v12144 = vmul.f32 %v11888, %v11888
  %v12145 = vmul.f32 %v11889, %v11889
  %v12146 = vmul.f32 %v11890, %v11890
  %v12147 = vmul.f32 %v11891, %v11891
  %v12148 = vmul.f32 %v11892, %v11892
  %v12149 = vmul.f32 %v11893, %v11893
  %v12150 = vmul.f32 %v11894, %v11894
  %v12151 = vmul.f32 %v11895, %v11895
  %v12152 = vmul.f32 %v11896, %v11896
  %v12153 = vmul.f32 %v11897, %v11897
  %v12154 = vmul.f32 %v11898, %v11898
  %v12155 = vmul.f32 %v11899, %v11899
  %v12156 = vmul.f32 %v11900, %v11900
  %v12157 = vmul.f32 %v11901, %v11901
  %v12158 = vmul.f32 %v11902, %v11902
  %v12159 = vmul.f32 %v11903, %v11903
  %v12160 = vmul.f32 %v11904, %v11904
  %v12161 = vmul.f32 %v11905, %v11905
  %v12162 = vmul.f32 %v11906, %v11906
  %v12163 = vmul.f32 %v11907, %v11907
  %v12164 = vmul.f32 %v11908, %v11908
  %v12165 = vmul.f32 %v11909, %v11909
  %v12166 = vmul.f32 %v11910, %v11910
  %v12167 = vmul.f32 %v11911, %v11911
  %v12168 = vmul.f32 %v11912, %v11912
  %v12169 = vmul.f32 %v11913, %v11913
  %v12170 = vmul.f32 %v11914, %v11914
  %v12171 = vmul.f32 %v11915, %v11915
  %v12172 = vmul.f32 %v11916, %v11916
  %v12173 = vmul.f32 %v11917, %v11917
  %v12174 = vmul.f32 %v11918, %v11918
  %v12175 = vmul.f32 %v11919, %v11919
  %v12176 = vmul.f32 %v11920, %v11920
  %v12177 = vmul.f32 %v11921, %v11921
  %v12178 = vmul.f32 %v11922, %v11922
  %v12179 = vmul.f32 %v11923, %v11923
  %v12180 = vmul.f32 %v11924, %v11924
  %v12181 = vmul.f32 %v11925, %v11925
  %v12182 = vsel %vm309, %v11926, 0.0
  %v12183 = vsel %vm309, %v11927, 0.0
  %v12184 = vadd.f32 %v12182, %v12183
  %v12185 = vsel %vm309, %v11928, 0.0
  %v12186 = vadd.f32 %v12184, %v12185
  %v12187 = vsel %vm309, %v11929, 0.0
  %v12188 = vadd.f32 %v12186, %v12187
  %v12189 = vsel %vm309, %v11930, 0.0
  %v12190 = vadd.f32 %v12188, %v12189
  %v12191 = vsel %vm309, %v11931, 0.0
  %v12192 = vadd.f32 %v12190, %v12191
  %v12193 = vsel %vm309, %v11932, 0.0
  %v12194 = vadd.f32 %v12192, %v12193
  %v12195 = vsel %vm309, %v11933, 0.0
  %v12196 = vadd.f32 %v12194, %v12195
  %v12197 = vsel %vm309, %v11934, 0.0
  %v12198 = vadd.f32 %v12196, %v12197
  %v12199 = vsel %vm309, %v11935, 0.0
  %v12200 = vadd.f32 %v12198, %v12199
  %v12201 = vsel %vm309, %v11936, 0.0
  %v12202 = vadd.f32 %v12200, %v12201
  %v12203 = vsel %vm309, %v11937, 0.0
  %v12204 = vadd.f32 %v12202, %v12203
  %v12205 = vsel %vm309, %v11938, 0.0
  %v12206 = vadd.f32 %v12204, %v12205
  %v12207 = vsel %vm309, %v11939, 0.0
  %v12208 = vadd.f32 %v12206, %v12207
  %v12209 = vsel %vm309, %v11940, 0.0
  %v12210 = vadd.f32 %v12208, %v12209
  %v12211 = vsel %vm309, %v11941, 0.0
  %v12212 = vadd.f32 %v12210, %v12211
  %v12213 = vsel %vm309, %v11942, 0.0
  %v12214 = vadd.f32 %v12212, %v12213
  %v12215 = vsel %vm309, %v11943, 0.0
  %v12216 = vadd.f32 %v12214, %v12215
  %v12217 = vsel %vm309, %v11944, 0.0
  %v12218 = vadd.f32 %v12216, %v12217
  %v12219 = vsel %vm309, %v11945, 0.0
  %v12220 = vadd.f32 %v12218, %v12219
  %v12221 = vsel %vm309, %v11946, 0.0
  %v12222 = vadd.f32 %v12220, %v12221
  %v12223 = vsel %vm309, %v11947, 0.0
  %v12224 = vadd.f32 %v12222, %v12223
  %v12225 = vsel %vm309, %v11948, 0.0
  %v12226 = vadd.f32 %v12224, %v12225
  %v12227 = vsel %vm309, %v11949, 0.0
  %v12228 = vadd.f32 %v12226, %v12227
  %v12229 = vsel %vm309, %v11950, 0.0
  %v12230 = vadd.f32 %v12228, %v12229
  %v12231 = vsel %vm309, %v11951, 0.0
  %v12232 = vadd.f32 %v12230, %v12231
  %v12233 = vsel %vm309, %v11952, 0.0
  %v12234 = vadd.f32 %v12232, %v12233
  %v12235 = vsel %vm309, %v11953, 0.0
  %v12236 = vadd.f32 %v12234, %v12235
  %v12237 = vsel %vm309, %v11954, 0.0
  %v12238 = vadd.f32 %v12236, %v12237
  %v12239 = vsel %vm309, %v11955, 0.0
  %v12240 = vadd.f32 %v12238, %v12239
  %v12241 = vsel %vm309, %v11956, 0.0
  %v12242 = vadd.f32 %v12240, %v12241
  %v12243 = vsel %vm309, %v11957, 0.0
  %v12244 = vadd.f32 %v12242, %v12243
  %v12245 = vsel %vm309, %v11958, 0.0
  %v12246 = vadd.f32 %v12244, %v12245
  %v12247 = vsel %vm309, %v11959, 0.0
  %v12248 = vadd.f32 %v12246, %v12247
  %v12249 = vsel %vm309, %v11960, 0.0
  %v12250 = vadd.f32 %v12248, %v12249
  %v12251 = vsel %vm309, %v11961, 0.0
  %v12252 = vadd.f32 %v12250, %v12251
  %v12253 = vsel %vm309, %v11962, 0.0
  %v12254 = vadd.f32 %v12252, %v12253
  %v12255 = vsel %vm309, %v11963, 0.0
  %v12256 = vadd.f32 %v12254, %v12255
  %v12257 = vsel %vm309, %v11964, 0.0
  %v12258 = vadd.f32 %v12256, %v12257
  %v12259 = vsel %vm309, %v11965, 0.0
  %v12260 = vadd.f32 %v12258, %v12259
  %v12261 = vsel %vm309, %v11966, 0.0
  %v12262 = vadd.f32 %v12260, %v12261
  %v12263 = vsel %vm309, %v11967, 0.0
  %v12264 = vadd.f32 %v12262, %v12263
  %v12265 = vsel %vm309, %v11968, 0.0
  %v12266 = vadd.f32 %v12264, %v12265
  %v12267 = vsel %vm309, %v11969, 0.0
  %v12268 = vadd.f32 %v12266, %v12267
  %v12269 = vsel %vm309, %v11970, 0.0
  %v12270 = vadd.f32 %v12268, %v12269
  %v12271 = vsel %vm309, %v11971, 0.0
  %v12272 = vadd.f32 %v12270, %v12271
  %v12273 = vsel %vm309, %v11972, 0.0
  %v12274 = vadd.f32 %v12272, %v12273
  %v12275 = vsel %vm309, %v11973, 0.0
  %v12276 = vadd.f32 %v12274, %v12275
  %v12277 = vsel %vm309, %v11974, 0.0
  %v12278 = vadd.f32 %v12276, %v12277
  %v12279 = vsel %vm309, %v11975, 0.0
  %v12280 = vadd.f32 %v12278, %v12279
  %v12281 = vsel %vm309, %v11976, 0.0
  %v12282 = vadd.f32 %v12280, %v12281
  %v12283 = vsel %vm309, %v11977, 0.0
  %v12284 = vadd.f32 %v12282, %v12283
  %v12285 = vsel %vm309, %v11978, 0.0
  %v12286 = vadd.f32 %v12284, %v12285
  %v12287 = vsel %vm309, %v11979, 0.0
  %v12288 = vadd.f32 %v12286, %v12287
  %v12289 = vsel %vm309, %v11980, 0.0
  %v12290 = vadd.f32 %v12288, %v12289
  %v12291 = vsel %vm309, %v11981, 0.0
  %v12292 = vadd.f32 %v12290, %v12291
  %v12293 = vsel %vm309, %v11982, 0.0
  %v12294 = vadd.f32 %v12292, %v12293
  %v12295 = vsel %vm309, %v11983, 0.0
  %v12296 = vadd.f32 %v12294, %v12295
  %v12297 = vsel %vm309, %v11984, 0.0
  %v12298 = vadd.f32 %v12296, %v12297
  %v12299 = vsel %vm309, %v11985, 0.0
  %v12300 = vadd.f32 %v12298, %v12299
  %v12301 = vsel %vm309, %v11986, 0.0
  %v12302 = vadd.f32 %v12300, %v12301
  %v12303 = vsel %vm309, %v11987, 0.0
  %v12304 = vadd.f32 %v12302, %v12303
  %v12305 = vsel %vm309, %v11988, 0.0
  %v12306 = vadd.f32 %v12304, %v12305
  %v12307 = vsel %vm309, %v11989, 0.0
  %v12308 = vadd.f32 %v12306, %v12307
  %v12309 = vsel %vm309, %v11990, 0.0
  %v12310 = vadd.f32 %v12308, %v12309
  %v12311 = vsel %vm309, %v11991, 0.0
  %v12312 = vadd.f32 %v12310, %v12311
  %v12313 = vsel %vm309, %v11992, 0.0
  %v12314 = vadd.f32 %v12312, %v12313
  %v12315 = vsel %vm309, %v11993, 0.0
  %v12316 = vadd.f32 %v12314, %v12315
  %v12317 = vsel %vm309, %v11994, 0.0
  %v12318 = vadd.f32 %v12316, %v12317
  %v12319 = vsel %vm309, %v11995, 0.0
  %v12320 = vadd.f32 %v12318, %v12319
  %v12321 = vsel %vm309, %v11996, 0.0
  %v12322 = vadd.f32 %v12320, %v12321
  %v12323 = vsel %vm309, %v11997, 0.0
  %v12324 = vadd.f32 %v12322, %v12323
  %v12325 = vsel %vm309, %v11998, 0.0
  %v12326 = vadd.f32 %v12324, %v12325
  %v12327 = vsel %vm309, %v11999, 0.0
  %v12328 = vadd.f32 %v12326, %v12327
  %v12329 = vsel %vm309, %v12000, 0.0
  %v12330 = vadd.f32 %v12328, %v12329
  %v12331 = vsel %vm309, %v12001, 0.0
  %v12332 = vadd.f32 %v12330, %v12331
  %v12333 = vsel %vm309, %v12002, 0.0
  %v12334 = vadd.f32 %v12332, %v12333
  %v12335 = vsel %vm309, %v12003, 0.0
  %v12336 = vadd.f32 %v12334, %v12335
  %v12337 = vsel %vm309, %v12004, 0.0
  %v12338 = vadd.f32 %v12336, %v12337
  %v12339 = vsel %vm309, %v12005, 0.0
  %v12340 = vadd.f32 %v12338, %v12339
  %v12341 = vsel %vm309, %v12006, 0.0
  %v12342 = vadd.f32 %v12340, %v12341
  %v12343 = vsel %vm309, %v12007, 0.0
  %v12344 = vadd.f32 %v12342, %v12343
  %v12345 = vsel %vm309, %v12008, 0.0
  %v12346 = vadd.f32 %v12344, %v12345
  %v12347 = vsel %vm309, %v12009, 0.0
  %v12348 = vadd.f32 %v12346, %v12347
  %v12349 = vsel %vm309, %v12010, 0.0
  %v12350 = vadd.f32 %v12348, %v12349
  %v12351 = vsel %vm309, %v12011, 0.0
  %v12352 = vadd.f32 %v12350, %v12351
  %v12353 = vsel %vm309, %v12012, 0.0
  %v12354 = vadd.f32 %v12352, %v12353
  %v12355 = vsel %vm309, %v12013, 0.0
  %v12356 = vadd.f32 %v12354, %v12355
  %v12357 = vsel %vm309, %v12014, 0.0
  %v12358 = vadd.f32 %v12356, %v12357
  %v12359 = vsel %vm309, %v12015, 0.0
  %v12360 = vadd.f32 %v12358, %v12359
  %v12361 = vsel %vm309, %v12016, 0.0
  %v12362 = vadd.f32 %v12360, %v12361
  %v12363 = vsel %vm309, %v12017, 0.0
  %v12364 = vadd.f32 %v12362, %v12363
  %v12365 = vsel %vm309, %v12018, 0.0
  %v12366 = vadd.f32 %v12364, %v12365
  %v12367 = vsel %vm309, %v12019, 0.0
  %v12368 = vadd.f32 %v12366, %v12367
  %v12369 = vsel %vm309, %v12020, 0.0
  %v12370 = vadd.f32 %v12368, %v12369
  %v12371 = vsel %vm309, %v12021, 0.0
  %v12372 = vadd.f32 %v12370, %v12371
  %v12373 = vsel %vm309, %v12022, 0.0
  %v12374 = vadd.f32 %v12372, %v12373
  %v12375 = vsel %vm309, %v12023, 0.0
  %v12376 = vadd.f32 %v12374, %v12375
  %v12377 = vsel %vm309, %v12024, 0.0
  %v12378 = vadd.f32 %v12376, %v12377
  %v12379 = vsel %vm309, %v12025, 0.0
  %v12380 = vadd.f32 %v12378, %v12379
  %v12381 = vsel %vm309, %v12026, 0.0
  %v12382 = vadd.f32 %v12380, %v12381
  %v12383 = vsel %vm309, %v12027, 0.0
  %v12384 = vadd.f32 %v12382, %v12383
  %v12385 = vsel %vm309, %v12028, 0.0
  %v12386 = vadd.f32 %v12384, %v12385
  %v12387 = vsel %vm309, %v12029, 0.0
  %v12388 = vadd.f32 %v12386, %v12387
  %v12389 = vsel %vm309, %v12030, 0.0
  %v12390 = vadd.f32 %v12388, %v12389
  %v12391 = vsel %vm309, %v12031, 0.0
  %v12392 = vadd.f32 %v12390, %v12391
  %v12393 = vsel %vm309, %v12032, 0.0
  %v12394 = vadd.f32 %v12392, %v12393
  %v12395 = vsel %vm309, %v12033, 0.0
  %v12396 = vadd.f32 %v12394, %v12395
  %v12397 = vsel %vm309, %v12034, 0.0
  %v12398 = vadd.f32 %v12396, %v12397
  %v12399 = vsel %vm309, %v12035, 0.0
  %v12400 = vadd.f32 %v12398, %v12399
  %v12401 = vsel %vm309, %v12036, 0.0
  %v12402 = vadd.f32 %v12400, %v12401
  %v12403 = vsel %vm309, %v12037, 0.0
  %v12404 = vadd.f32 %v12402, %v12403
  %v12405 = vsel %vm309, %v12038, 0.0
  %v12406 = vadd.f32 %v12404, %v12405
  %v12407 = vsel %vm309, %v12039, 0.0
  %v12408 = vadd.f32 %v12406, %v12407
  %v12409 = vsel %vm309, %v12040, 0.0
  %v12410 = vadd.f32 %v12408, %v12409
  %v12411 = vsel %vm309, %v12041, 0.0
  %v12412 = vadd.f32 %v12410, %v12411
  %v12413 = vsel %vm309, %v12042, 0.0
  %v12414 = vadd.f32 %v12412, %v12413
  %v12415 = vsel %vm309, %v12043, 0.0
  %v12416 = vadd.f32 %v12414, %v12415
  %v12417 = vsel %vm309, %v12044, 0.0
  %v12418 = vadd.f32 %v12416, %v12417
  %v12419 = vsel %vm309, %v12045, 0.0
  %v12420 = vadd.f32 %v12418, %v12419
  %v12421 = vsel %vm309, %v12046, 0.0
  %v12422 = vadd.f32 %v12420, %v12421
  %v12423 = vsel %vm309, %v12047, 0.0
  %v12424 = vadd.f32 %v12422, %v12423
  %v12425 = vsel %vm309, %v12048, 0.0
  %v12426 = vadd.f32 %v12424, %v12425
  %v12427 = vsel %vm309, %v12049, 0.0
  %v12428 = vadd.f32 %v12426, %v12427
  %v12429 = vsel %vm309, %v12050, 0.0
  %v12430 = vadd.f32 %v12428, %v12429
  %v12431 = vsel %vm309, %v12051, 0.0
  %v12432 = vadd.f32 %v12430, %v12431
  %v12433 = vsel %vm309, %v12052, 0.0
  %v12434 = vadd.f32 %v12432, %v12433
  %v12435 = vsel %vm309, %v12053, 0.0
  %v12436 = vadd.f32 %v12434, %v12435
  %v12437 = vsel %vm309, %v12054, 0.0
  %v12438 = vadd.f32 %v12436, %v12437
  %v12439 = vsel %vm309, %v12055, 0.0
  %v12440 = vadd.f32 %v12438, %v12439
  %v12441 = vsel %vm309, %v12056, 0.0
  %v12442 = vadd.f32 %v12440, %v12441
  %v12443 = vsel %vm309, %v12057, 0.0
  %v12444 = vadd.f32 %v12442, %v12443
  %v12445 = vsel %vm309, %v12058, 0.0
  %v12446 = vadd.f32 %v12444, %v12445
  %v12447 = vsel %vm309, %v12059, 0.0
  %v12448 = vadd.f32 %v12446, %v12447
  %v12449 = vsel %vm309, %v12060, 0.0
  %v12450 = vadd.f32 %v12448, %v12449
  %v12451 = vsel %vm309, %v12061, 0.0
  %v12452 = vadd.f32 %v12450, %v12451
  %v12453 = vsel %vm309, %v12062, 0.0
  %v12454 = vadd.f32 %v12452, %v12453
  %v12455 = vsel %vm309, %v12063, 0.0
  %v12456 = vadd.f32 %v12454, %v12455
  %v12457 = vsel %vm309, %v12064, 0.0
  %v12458 = vadd.f32 %v12456, %v12457
  %v12459 = vsel %vm309, %v12065, 0.0
  %v12460 = vadd.f32 %v12458, %v12459
  %v12461 = vsel %vm309, %v12066, 0.0
  %v12462 = vadd.f32 %v12460, %v12461
  %v12463 = vsel %vm309, %v12067, 0.0
  %v12464 = vadd.f32 %v12462, %v12463
  %v12465 = vsel %vm309, %v12068, 0.0
  %v12466 = vadd.f32 %v12464, %v12465
  %v12467 = vsel %vm309, %v12069, 0.0
  %v12468 = vadd.f32 %v12466, %v12467
  %v12469 = vsel %vm309, %v12070, 0.0
  %v12470 = vadd.f32 %v12468, %v12469
  %v12471 = vsel %vm309, %v12071, 0.0
  %v12472 = vadd.f32 %v12470, %v12471
  %v12473 = vsel %vm309, %v12072, 0.0
  %v12474 = vadd.f32 %v12472, %v12473
  %v12475 = vsel %vm309, %v12073, 0.0
  %v12476 = vadd.f32 %v12474, %v12475
  %v12477 = vsel %vm309, %v12074, 0.0
  %v12478 = vadd.f32 %v12476, %v12477
  %v12479 = vsel %vm309, %v12075, 0.0
  %v12480 = vadd.f32 %v12478, %v12479
  %v12481 = vsel %vm309, %v12076, 0.0
  %v12482 = vadd.f32 %v12480, %v12481
  %v12483 = vsel %vm309, %v12077, 0.0
  %v12484 = vadd.f32 %v12482, %v12483
  %v12485 = vsel %vm309, %v12078, 0.0
  %v12486 = vadd.f32 %v12484, %v12485
  %v12487 = vsel %vm309, %v12079, 0.0
  %v12488 = vadd.f32 %v12486, %v12487
  %v12489 = vsel %vm309, %v12080, 0.0
  %v12490 = vadd.f32 %v12488, %v12489
  %v12491 = vsel %vm309, %v12081, 0.0
  %v12492 = vadd.f32 %v12490, %v12491
  %v12493 = vsel %vm309, %v12082, 0.0
  %v12494 = vadd.f32 %v12492, %v12493
  %v12495 = vsel %vm309, %v12083, 0.0
  %v12496 = vadd.f32 %v12494, %v12495
  %v12497 = vsel %vm309, %v12084, 0.0
  %v12498 = vadd.f32 %v12496, %v12497
  %v12499 = vsel %vm309, %v12085, 0.0
  %v12500 = vadd.f32 %v12498, %v12499
  %v12501 = vsel %vm309, %v12086, 0.0
  %v12502 = vadd.f32 %v12500, %v12501
  %v12503 = vsel %vm309, %v12087, 0.0
  %v12504 = vadd.f32 %v12502, %v12503
  %v12505 = vsel %vm309, %v12088, 0.0
  %v12506 = vadd.f32 %v12504, %v12505
  %v12507 = vsel %vm309, %v12089, 0.0
  %v12508 = vadd.f32 %v12506, %v12507
  %v12509 = vsel %vm309, %v12090, 0.0
  %v12510 = vadd.f32 %v12508, %v12509
  %v12511 = vsel %vm309, %v12091, 0.0
  %v12512 = vadd.f32 %v12510, %v12511
  %v12513 = vsel %vm309, %v12092, 0.0
  %v12514 = vadd.f32 %v12512, %v12513
  %v12515 = vsel %vm309, %v12093, 0.0
  %v12516 = vadd.f32 %v12514, %v12515
  %v12517 = vsel %vm309, %v12094, 0.0
  %v12518 = vadd.f32 %v12516, %v12517
  %v12519 = vsel %vm309, %v12095, 0.0
  %v12520 = vadd.f32 %v12518, %v12519
  %v12521 = vsel %vm309, %v12096, 0.0
  %v12522 = vadd.f32 %v12520, %v12521
  %v12523 = vsel %vm309, %v12097, 0.0
  %v12524 = vadd.f32 %v12522, %v12523
  %v12525 = vsel %vm309, %v12098, 0.0
  %v12526 = vadd.f32 %v12524, %v12525
  %v12527 = vsel %vm309, %v12099, 0.0
  %v12528 = vadd.f32 %v12526, %v12527
  %v12529 = vsel %vm309, %v12100, 0.0
  %v12530 = vadd.f32 %v12528, %v12529
  %v12531 = vsel %vm309, %v12101, 0.0
  %v12532 = vadd.f32 %v12530, %v12531
  %v12533 = vsel %vm309, %v12102, 0.0
  %v12534 = vadd.f32 %v12532, %v12533
  %v12535 = vsel %vm309, %v12103, 0.0
  %v12536 = vadd.f32 %v12534, %v12535
  %v12537 = vsel %vm309, %v12104, 0.0
  %v12538 = vadd.f32 %v12536, %v12537
  %v12539 = vsel %vm309, %v12105, 0.0
  %v12540 = vadd.f32 %v12538, %v12539
  %v12541 = vsel %vm309, %v12106, 0.0
  %v12542 = vadd.f32 %v12540, %v12541
  %v12543 = vsel %vm309, %v12107, 0.0
  %v12544 = vadd.f32 %v12542, %v12543
  %v12545 = vsel %vm309, %v12108, 0.0
  %v12546 = vadd.f32 %v12544, %v12545
  %v12547 = vsel %vm309, %v12109, 0.0
  %v12548 = vadd.f32 %v12546, %v12547
  %v12549 = vsel %vm309, %v12110, 0.0
  %v12550 = vadd.f32 %v12548, %v12549
  %v12551 = vsel %vm309, %v12111, 0.0
  %v12552 = vadd.f32 %v12550, %v12551
  %v12553 = vsel %vm309, %v12112, 0.0
  %v12554 = vadd.f32 %v12552, %v12553
  %v12555 = vsel %vm309, %v12113, 0.0
  %v12556 = vadd.f32 %v12554, %v12555
  %v12557 = vsel %vm309, %v12114, 0.0
  %v12558 = vadd.f32 %v12556, %v12557
  %v12559 = vsel %vm309, %v12115, 0.0
  %v12560 = vadd.f32 %v12558, %v12559
  %v12561 = vsel %vm309, %v12116, 0.0
  %v12562 = vadd.f32 %v12560, %v12561
  %v12563 = vsel %vm309, %v12117, 0.0
  %v12564 = vadd.f32 %v12562, %v12563
  %v12565 = vsel %vm309, %v12118, 0.0
  %v12566 = vadd.f32 %v12564, %v12565
  %v12567 = vsel %vm309, %v12119, 0.0
  %v12568 = vadd.f32 %v12566, %v12567
  %v12569 = vsel %vm309, %v12120, 0.0
  %v12570 = vadd.f32 %v12568, %v12569
  %v12571 = vsel %vm309, %v12121, 0.0
  %v12572 = vadd.f32 %v12570, %v12571
  %v12573 = vsel %vm309, %v12122, 0.0
  %v12574 = vadd.f32 %v12572, %v12573
  %v12575 = vsel %vm309, %v12123, 0.0
  %v12576 = vadd.f32 %v12574, %v12575
  %v12577 = vsel %vm309, %v12124, 0.0
  %v12578 = vadd.f32 %v12576, %v12577
  %v12579 = vsel %vm309, %v12125, 0.0
  %v12580 = vadd.f32 %v12578, %v12579
  %v12581 = vsel %vm309, %v12126, 0.0
  %v12582 = vadd.f32 %v12580, %v12581
  %v12583 = vsel %vm309, %v12127, 0.0
  %v12584 = vadd.f32 %v12582, %v12583
  %v12585 = vsel %vm309, %v12128, 0.0
  %v12586 = vadd.f32 %v12584, %v12585
  %v12587 = vsel %vm309, %v12129, 0.0
  %v12588 = vadd.f32 %v12586, %v12587
  %v12589 = vsel %vm309, %v12130, 0.0
  %v12590 = vadd.f32 %v12588, %v12589
  %v12591 = vsel %vm309, %v12131, 0.0
  %v12592 = vadd.f32 %v12590, %v12591
  %v12593 = vsel %vm309, %v12132, 0.0
  %v12594 = vadd.f32 %v12592, %v12593
  %v12595 = vsel %vm309, %v12133, 0.0
  %v12596 = vadd.f32 %v12594, %v12595
  %v12597 = vsel %vm309, %v12134, 0.0
  %v12598 = vadd.f32 %v12596, %v12597
  %v12599 = vsel %vm309, %v12135, 0.0
  %v12600 = vadd.f32 %v12598, %v12599
  %v12601 = vsel %vm309, %v12136, 0.0
  %v12602 = vadd.f32 %v12600, %v12601
  %v12603 = vsel %vm309, %v12137, 0.0
  %v12604 = vadd.f32 %v12602, %v12603
  %v12605 = vsel %vm309, %v12138, 0.0
  %v12606 = vadd.f32 %v12604, %v12605
  %v12607 = vsel %vm309, %v12139, 0.0
  %v12608 = vadd.f32 %v12606, %v12607
  %v12609 = vsel %vm309, %v12140, 0.0
  %v12610 = vadd.f32 %v12608, %v12609
  %v12611 = vsel %vm309, %v12141, 0.0
  %v12612 = vadd.f32 %v12610, %v12611
  %v12613 = vsel %vm309, %v12142, 0.0
  %v12614 = vadd.f32 %v12612, %v12613
  %v12615 = vsel %vm309, %v12143, 0.0
  %v12616 = vadd.f32 %v12614, %v12615
  %v12617 = vsel %vm309, %v12144, 0.0
  %v12618 = vadd.f32 %v12616, %v12617
  %v12619 = vsel %vm309, %v12145, 0.0
  %v12620 = vadd.f32 %v12618, %v12619
  %v12621 = vsel %vm309, %v12146, 0.0
  %v12622 = vadd.f32 %v12620, %v12621
  %v12623 = vsel %vm309, %v12147, 0.0
  %v12624 = vadd.f32 %v12622, %v12623
  %v12625 = vsel %vm309, %v12148, 0.0
  %v12626 = vadd.f32 %v12624, %v12625
  %v12627 = vsel %vm309, %v12149, 0.0
  %v12628 = vadd.f32 %v12626, %v12627
  %v12629 = vsel %vm309, %v12150, 0.0
  %v12630 = vadd.f32 %v12628, %v12629
  %v12631 = vsel %vm309, %v12151, 0.0
  %v12632 = vadd.f32 %v12630, %v12631
  %v12633 = vsel %vm309, %v12152, 0.0
  %v12634 = vadd.f32 %v12632, %v12633
  %v12635 = vsel %vm309, %v12153, 0.0
  %v12636 = vadd.f32 %v12634, %v12635
  %v12637 = vsel %vm309, %v12154, 0.0
  %v12638 = vadd.f32 %v12636, %v12637
  %v12639 = vsel %vm309, %v12155, 0.0
  %v12640 = vadd.f32 %v12638, %v12639
  %v12641 = vsel %vm309, %v12156, 0.0
  %v12642 = vadd.f32 %v12640, %v12641
  %v12643 = vsel %vm309, %v12157, 0.0
  %v12644 = vadd.f32 %v12642, %v12643
  %v12645 = vsel %vm309, %v12158, 0.0
  %v12646 = vadd.f32 %v12644, %v12645
  %v12647 = vsel %vm309, %v12159, 0.0
  %v12648 = vadd.f32 %v12646, %v12647
  %v12649 = vsel %vm309, %v12160, 0.0
  %v12650 = vadd.f32 %v12648, %v12649
  %v12651 = vsel %vm309, %v12161, 0.0
  %v12652 = vadd.f32 %v12650, %v12651
  %v12653 = vsel %vm309, %v12162, 0.0
  %v12654 = vadd.f32 %v12652, %v12653
  %v12655 = vsel %vm309, %v12163, 0.0
  %v12656 = vadd.f32 %v12654, %v12655
  %v12657 = vsel %vm309, %v12164, 0.0
  %v12658 = vadd.f32 %v12656, %v12657
  %v12659 = vsel %vm309, %v12165, 0.0
  %v12660 = vadd.f32 %v12658, %v12659
  %v12661 = vsel %vm309, %v12166, 0.0
  %v12662 = vadd.f32 %v12660, %v12661
  %v12663 = vsel %vm309, %v12167, 0.0
  %v12664 = vadd.f32 %v12662, %v12663
  %v12665 = vsel %vm309, %v12168, 0.0
  %v12666 = vadd.f32 %v12664, %v12665
  %v12667 = vsel %vm309, %v12169, 0.0
  %v12668 = vadd.f32 %v12666, %v12667
  %v12669 = vsel %vm309, %v12170, 0.0
  %v12670 = vadd.f32 %v12668, %v12669
  %v12671 = vsel %vm309, %v12171, 0.0
  %v12672 = vadd.f32 %v12670, %v12671
  %v12673 = vsel %vm309, %v12172, 0.0
  %v12674 = vadd.f32 %v12672, %v12673
  %v12675 = vsel %vm309, %v12173, 0.0
  %v12676 = vadd.f32 %v12674, %v12675
  %v12677 = vsel %vm309, %v12174, 0.0
  %v12678 = vadd.f32 %v12676, %v12677
  %v12679 = vsel %vm309, %v12175, 0.0
  %v12680 = vadd.f32 %v12678, %v12679
  %v12681 = vsel %vm309, %v12176, 0.0
  %v12682 = vadd.f32 %v12680, %v12681
  %v12683 = vsel %vm309, %v12177, 0.0
  %v12684 = vadd.f32 %v12682, %v12683
  %v12685 = vsel %vm309, %v12178, 0.0
  %v12686 = vadd.f32 %v12684, %v12685
  %v12687 = vsel %vm309, %v12179, 0.0
  %v12688 = vadd.f32 %v12686, %v12687
  %v12689 = vsel %vm309, %v12180, 0.0
  %v12690 = vadd.f32 %v12688, %v12689
  %v12691 = vsel %vm309, %v12181, 0.0
  %v12692 = vadd.f32 %v12690, %v12691
  %v12693 = vrot.slane %v12692, 4
  %v12694 = vadd.f32 %v12692, %v12693
  %v12695 = vrot.slane %v12694, 2
  %v12696 = vadd.f32 %v12694, %v12695
  %v12697 = vrot.slane %v12696, 1
  %v12698 = vadd.f32 %v12696, %v12697
  %vm12699 = vcmask 253952
  %12700 = vst.msk [vmem:[%s7] sm:$0x1] %vm12699, %v12698
  // Predicated region
  $region18: #{vector_quantize.1} parent=0 // pred_check
    _
  $region19: #{vector_quantize.1} parent=0 // pred_check_branch
    %12702 = sbr.rel (0) target = $region21
  $region20: #{vector_quantize.1} parent=0 // pred_region
    _
  $region21: #{vector_quantize.1} parent=0 // pred_fallthru
    _
  // Predicated region
  $region22: #{vector_quantize.1} parent=0 // pred_check
    _
  $region23: #{vector_quantize.1} parent=0 // pred_check_branch
    %12704 = sbr.rel (0) target = $region25
  $region24: #{vector_quantize.1} parent=0 // pred_region
    _
  $region25: #{vector_quantize.1} parent=0 // pred_fallthru
    _
  // Predicated region
  $region26: #{vector_quantize.1} parent=0 // pred_check
    _
  $region27: #{vector_quantize.1} parent=0 // pred_check_branch
    %12706 = sbr.rel (0) target = $region29
  $region28: #{vector_quantize.1} parent=0 // pred_region
    _
  $region29: #{vector_quantize.1} parent=0 // pred_fallthru
    _
  // Predicated region
  $region30: #{vector_quantize.1} parent=0 // pred_check
    _
  $region31: #{vector_quantize.1} parent=0 // pred_check_branch
    %12708 = sbr.rel (0) target = $region33
  $region32: #{vector_quantize.1} parent=0 // pred_region
    _
  $region33: #{vector_quantize.1} parent=0 // pred_fallthru
    _
  // Predicated region
  $region34: #{vector_quantize.1} parent=0 // pred_check
    _
  $region35: #{vector_quantize.1} parent=0 // pred_check_branch
    %12710 = sbr.rel (0) target = $region37
  $region36: #{vector_quantize.1} parent=0 // pred_region
    _
  $region37: #{vector_quantize.1} parent=0 // pred_fallthru
    _
  // Predicated region
  $region38: #{vector_quantize.1} parent=0 // pred_check
    _
  $region39: #{vector_quantize.1} parent=0 // pred_check_branch
    %12712 = sbr.rel (0) target = $region41
  $region40: #{vector_quantize.1} parent=0 // pred_region
    _
  $region41: #{vector_quantize.1} parent=0 // pred_fallthru
    _
  // Predicated region
  $region42: #{vector_quantize.1} parent=0 // pred_check
    _
  $region43: #{vector_quantize.1} parent=0 // pred_check_branch
    %12714 = sbr.rel (0) target = $region45
  $region44: #{vector_quantize.1} parent=0 // pred_region
    _
  $region45: #{vector_quantize.1} parent=0 // pred_fallthru
    _
  // Predicated region
  $region46: #{vector_quantize.1} parent=0 // pred_check
    _
  $region47: #{vector_quantize.1} parent=0 // pred_check_branch
    %12716 = sbr.rel (0) target = $region49
  $region48: #{vector_quantize.1} parent=0 // pred_region
    _
  $region49: #{vector_quantize.1} parent=0 // pred_fallthru
    _

</llo_original>
